<compile_context>
chip_gen: v7x
topology: tpu7x:2x2x1
jax: 0.10.0
libtpu: 0.0.40
codegen_flags: <defaults>
</compile_context>

<pallas_src>
import functools

import numpy as np
import jax
import jax.numpy as jnp
from jax import lax
from jax.experimental import pallas as pl
from jax.experimental.pallas import tpu as pltpu


def _round_up(x, m):
    return (x + m - 1) // m * m


def _stable_sigmoid(x):
    # exp() argument is always <= 0 -> no overflow to inf for large |x|
    pos = 1.0 / (1.0 + jnp.exp(-jnp.abs(x)))
    return jnp.where(x >= 0, pos, 1.0 - pos)


# ----------------------------------------------------------------------------
# Pallas kernels
# ----------------------------------------------------------------------------
def _matmul_bias_act_kernel(x_ref, w_ref, b_ref, o_ref, *, activation):
    acc = jnp.dot(x_ref[...], w_ref[...], preferred_element_type=jnp.float32)
    acc = acc + b_ref[...]
    if activation == "relu":
        acc = jnp.maximum(acc, 0.0)
    elif activation == "sigmoid":
        acc = _stable_sigmoid(acc)
    o_ref[...] = acc.astype(o_ref.dtype)


# Conservative: fits v7x's 64 MiB VMEM (and default scoped limits) with margin,
# accounting for double-buffering of every operand.
_SINGLE_BLOCK_VMEM_BUDGET = 12 * 1024 * 1024


def matmul_bias_act(x, w, b, activation="none"):
    """y = act(x @ w + b).  x:(M,K) w:(K,N) b:(N,)  -> (M,N), all f32."""
    M, K = x.shape
    N = w.shape[1]
    b2 = b.reshape(1, N)
    kernel = functools.partial(_matmul_bias_act_kernel, activation=activation)

    # Rough per-call VMEM need (f32, x2 for pipeline double-buffering).
    est = 8 * (M * K + K * N + N + M * N)
    if est <= _SINGLE_BLOCK_VMEM_BUDGET:
        # Whole problem in one grid step: no M padding, no output slicing,
        # no per-step overhead.
        return pl.pallas_call(
            kernel,
            out_shape=jax.ShapeDtypeStruct((M, N), jnp.float32),
            grid=(1,),
            in_specs=[
                pl.BlockSpec((M, K), lambda i: (0, 0)),
                pl.BlockSpec((K, N), lambda i: (0, 0)),
                pl.BlockSpec((1, N), lambda i: (0, 0)),
            ],
            out_specs=pl.BlockSpec((M, N), lambda i: (0, 0)),
            compiler_params=pltpu.CompilerParams(
                dimension_semantics=("arbitrary",)),
        )(x, w, b2)

    # Fallback for large M: big tiles, rows independent -> "parallel" so v7x can
    # shard the grid across both TensorCores.
    tm = 512
    Mp = _round_up(M, tm)
    if Mp != M:
        x = jnp.pad(x, ((0, Mp - M), (0, 0)))
    out = pl.pallas_call(
        kernel,
        out_shape=jax.ShapeDtypeStruct((Mp, N), jnp.float32),
        grid=(Mp // tm,),
        in_specs=[
            pl.BlockSpec((tm, K), lambda i: (i, 0)),
            pl.BlockSpec((K, N), lambda i: (0, 0)),
            pl.BlockSpec((1, N), lambda i: (0, 0)),
        ],
        out_specs=pl.BlockSpec((tm, N), lambda i: (i, 0)),
        compiler_params=pltpu.CompilerParams(
            dimension_semantics=("parallel",)),
    )(x, w, b2)
    return out[:M]


def _mlp_head_kernel(x_ref, w1_ref, b1_ref, w2_ref, b2_ref, w3_ref, b3_ref,
                     o_ref):
    # linear1 + ReLU -> linear2 + ReLU -> linear3 + sigmoid, all in VMEM.
    h = jnp.dot(x_ref[...], w1_ref[...], preferred_element_type=jnp.float32)
    h = jnp.maximum(h + b1_ref[...], 0.0)
    h = jnp.dot(h, w2_ref[...], preferred_element_type=jnp.float32)
    h = jnp.maximum(h + b2_ref[...], 0.0)
    h = jnp.dot(h, w3_ref[...], preferred_element_type=jnp.float32)
    o_ref[...] = _stable_sigmoid(h + b3_ref[...]).astype(o_ref.dtype)


def mlp_head(x, w1, b1, w2, b2, w3, b3):
    """Fused 3-layer classifier head in a single pallas_call (weights ~0.5 MiB)."""
    M, K1 = x.shape
    N1, N2, N3 = w1.shape[1], w2.shape[1], w3.shape[1]
    Mp = _round_up(M, 8)
    if Mp != M:
        x = jnp.pad(x, ((0, Mp - M), (0, 0)))   # tiny (batch rows only)
    out = pl.pallas_call(
        _mlp_head_kernel,
        out_shape=jax.ShapeDtypeStruct((Mp, N3), jnp.float32),
        grid=(1,),
        in_specs=[
            pl.BlockSpec((Mp, K1), lambda i: (0, 0)),
            pl.BlockSpec((K1, N1), lambda i: (0, 0)),
            pl.BlockSpec((1, N1), lambda i: (0, 0)),
            pl.BlockSpec((N1, N2), lambda i: (0, 0)),
            pl.BlockSpec((1, N2), lambda i: (0, 0)),
            pl.BlockSpec((N2, N3), lambda i: (0, 0)),
            pl.BlockSpec((1, N3), lambda i: (0, 0)),
        ],
        out_specs=pl.BlockSpec((Mp, N3), lambda i: (0, 0)),
        compiler_params=pltpu.CompilerParams(
            dimension_semantics=("arbitrary",)),
    )(x, w1, b1.reshape(1, N1), w2, b2.reshape(1, N2), w3, b3.reshape(1, N3))
    return out[:M]


def _max_over_taps_kernel(w_ref, o_ref):
    # w_ref: (9, M, C) -> dense vector max over the 9 pooling taps
    o_ref[...] = jnp.max(w_ref[...], axis=0)


def maxpool_3x3_s2(x):
    """MaxPool2d(kernel_size=3, stride=2, padding=0) on NHWC input."""
    B, H, W, C = x.shape
    Ho = (H - 3) // 2 + 1
    Wo = (W - 3) // 2 + 1
    taps = []
    for kh in range(3):
        for kw in range(3):
            taps.append(x[:, kh:kh + 2 * (Ho - 1) + 1:2,
                            kw:kw + 2 * (Wo - 1) + 1:2, :])
    M = B * Ho * Wo
    wins = jnp.stack(taps, axis=0).reshape(9, M, C)
    out = pl.pallas_call(
        _max_over_taps_kernel,
        out_shape=jax.ShapeDtypeStruct((M, C), jnp.float32),
        grid=(1,),                                   # single step, whole block
        in_specs=[pl.BlockSpec((9, M, C), lambda i: (0, 0, 0))],
        out_specs=pl.BlockSpec((M, C), lambda i: (0, 0)),
        compiler_params=pltpu.CompilerParams(
            dimension_semantics=("arbitrary",)),
    )(wins)
    return out.reshape(B, Ho, Wo, C)


def conv2d_relu(x, w, b, stride):
    """Conv2d(padding=0) + ReLU.  x:(B,H,W,Cin) NHWC, w:(kh,kw,Cin,Cout)."""
    B, H, W, Cin = x.shape
    kh, kw, _, Cout = w.shape
    Ho = (H - kh) // stride + 1
    Wo = (W - kw) // stride + 1
    cols = []
    for i in range(kh):
        for j in range(kw):
            cols.append(x[:, i:i + stride * (Ho - 1) + 1:stride,
                            j:j + stride * (Wo - 1) + 1:stride, :])
    # (B,Ho,Wo,9,Cin) flattened in (kh,kw,ci) order to match w.reshape below
    cols = jnp.stack(cols, axis=3).reshape(B * Ho * Wo, kh * kw * Cin)
    wmat = w.reshape(kh * kw * Cin, Cout)
    y = matmul_bias_act(cols, wmat, b, activation="relu")
    return y.reshape(B, Ho, Wo, Cout)


# ----------------------------------------------------------------------------
# AlexNet forward (Pallas path)
# ----------------------------------------------------------------------------
@jax.jit
def alexnet_forward_pallas(x_nchw, params):
    x = jnp.transpose(x_nchw, (0, 2, 3, 1)).astype(jnp.float32)   # NCHW -> NHWC
    x = conv2d_relu(x, params["w1"], params["b1"], stride=1)      # conv1 + ReLU
    x = maxpool_3x3_s2(x)                                         # maxPool1
    x = conv2d_relu(x, params["w2"], params["b2"], stride=2)      # conv2 + ReLU
    x = maxpool_3x3_s2(x)                                         # maxPool2
    # nn.Flatten on NCHW orders features (C, H, W): transpose back before flatten
    B = x.shape[0]
    x = jnp.transpose(x, (0, 3, 1, 2)).reshape(B, -1)             # (B, 3200)
    # fused linear1+ReLU -> linear2+ReLU -> linear3+sigmoid (single pallas_call)
    x = mlp_head(x, params["lw1"], params["lb1"],
                 params["lw2"], params["lb2"],
                 params["lw3"], params["lb3"])
    return x


# ----------------------------------------------------------------------------
# Pure-JAX reference (mirrors the PyTorch module exactly, NCHW throughout)
# ----------------------------------------------------------------------------
def alexnet_forward_reference(x_nchw, params):
    def conv(x, w_hwio, b, stride):
        w = jnp.transpose(w_hwio, (3, 2, 0, 1))                   # -> OIHW
        y = lax.conv_general_dilated(x, w, (stride, stride), "VALID",
                                     dimension_numbers=("NCHW", "OIHW", "NCHW"))
        return y + b[None, :, None, None]

    def maxpool(x):
        return lax.reduce_window(x, -jnp.inf, lax.max,
                                 (1, 1, 3, 3), (1, 1, 2, 2), "VALID")

    x = jnp.maximum(conv(x_nchw, params["w1"], params["b1"], 1), 0.0)
    x = maxpool(x)
    x = jnp.maximum(conv(x, params["w2"], params["b2"], 2), 0.0)
    x = maxpool(x)
    x = x.reshape(x.shape[0], -1)
    x = jnp.maximum(x @ params["lw1"] + params["lb1"], 0.0)
    x = jnp.maximum(x @ params["lw2"] + params["lb2"], 0.0)
    x = jax.nn.sigmoid(x @ params["lw3"] + params["lb3"])
    return x


# ----------------------------------------------------------------------------
# Deterministic parameter init (shapes from the nn.Module __init__)
# ----------------------------------------------------------------------------
def init_params(key, input_channels, nb_classes):
    ks = jax.random.split(key, 10)

    def u(k, shape, fan_in):
        s = 1.0 / np.sqrt(fan_in)
        return jax.random.uniform(k, shape, jnp.float32, -s, s)

    p = {}
    p["w1"] = u(ks[0], (3, 3, input_channels, 64), 9 * input_channels)
    p["b1"] = u(ks[1], (64,), 9 * input_channels)
    p["w2"] = u(ks[2], (3, 3, 64, 128), 9 * 64)
    p["b2"] = u(ks[3], (128,), 9 * 64)
    p["lw1"] = u(ks[4], (3200, 39), 3200)
    p["lb1"] = u(ks[5], (39,), 3200)
    p["lw2"] = u(ks[6], (39, 10), 39)
    p["lb2"] = u(ks[7], (10,), 39)
    p["lw3"] = u(ks[8], (10, nb_classes), 10)
    p["lb3"] = u(ks[9], (nb_classes,), 10)
    return p


if __name__ == "__main__":
    # linear1 expects 3200 = 128 * 5 * 5 features -> input spatial must be 49x49.
    input_channels = 3
    nb_classes = 5
    key = jax.random.PRNGKey(0)
    kx, kp = jax.random.split(key)
    x = jax.random.normal(kx, (2, input_channels, 49, 49), jnp.float32)
    params = init_params(kp, input_channels, nb_classes)

    out = alexnet_forward_pallas(x, params)
    out = jax.block_until_ready(out)
    assert out.shape == (2, nb_classes)

    ref = alexnet_forward_reference(x, params)
    np.testing.assert_allclose(np.asarray(out), np.asarray(ref),
                               rtol=1e-4, atol=1e-4)
    print("KERNEL_OK")
</pallas_src>

<mosaic_0001>
module attributes {stable_mosaic.version = 11 : i64} {
  func.func @_matmul_bias_act_kernel(%arg0: i32, %arg1: memref<4418x27xf32, #tpu.memory_space<vmem>>, %arg2: memref<27x64xf32, #tpu.memory_space<vmem>>, %arg3: memref<1x64xf32, #tpu.memory_space<vmem>>, %arg4: memref<4418x64xf32, #tpu.memory_space<vmem>>) attributes {dimension_semantics = [#tpu.dimension_semantics<arbitrary>], iteration_bounds = array<i64: 1>, scalar_prefetch = 0 : i64, scratch_operands = 0 : i64, tpu.core_type = #tpu.core_type<tc>, window_params = [{pipeline_mode = #tpu.pipeline_mode<synchronous>, transform_indices = @transform_0, window_bounds = array<i64: 4418, 27>}, {pipeline_mode = #tpu.pipeline_mode<synchronous>, transform_indices = @transform_1, window_bounds = array<i64: 27, 64>}, {pipeline_mode = #tpu.pipeline_mode<synchronous>, transform_indices = @transform_2, window_bounds = array<i64: 1, 64>}, {pipeline_mode = #tpu.pipeline_mode<synchronous>, transform_indices = @transform_3, window_bounds = array<i64: 4418, 64>}]} {
    %c0 = arith.constant 0 : index
    %c0_0 = arith.constant 0 : index
    %0 = vector.load %arg1[%c0, %c0_0] : memref<4418x27xf32, #tpu.memory_space<vmem>>, vector<4418x27xf32>
    %c0_1 = arith.constant 0 : index
    %c0_2 = arith.constant 0 : index
    %1 = vector.load %arg2[%c0_1, %c0_2] : memref<27x64xf32, #tpu.memory_space<vmem>>, vector<27x64xf32>
    %cst = arith.constant dense<0.000000e+00> : vector<4418x64xf32>
    %2 = tpu.matmul %0, %1, %cst {dimension_numbers = #tpu.dot_dimension_numbers<[1], [0], [0], [1], [0, 0, 1, 1], [], []>} : vector<4418x27xf32>, vector<27x64xf32>, vector<4418x64xf32> -> vector<4418x64xf32>
    %c0_3 = arith.constant 0 : index
    %c0_4 = arith.constant 0 : index
    %3 = vector.load %arg3[%c0_3, %c0_4] : memref<1x64xf32, #tpu.memory_space<vmem>>, vector<1x64xf32>
    %4 = vector.broadcast %3 : vector<1x64xf32> to vector<4418x64xf32>
    %5 = arith.addf %2, %4 : vector<4418x64xf32>
    %cst_5 = arith.constant 0.000000e+00 : f32
    %6 = vector.broadcast %cst_5 : f32 to vector<4418x64xf32>
    %7 = arith.maximumf %5, %6 : vector<4418x64xf32>
    %c0_6 = arith.constant 0 : index
    %c0_7 = arith.constant 0 : index
    %8 = vector.load %arg4[%c0_6, %c0_7] : memref<4418x64xf32, #tpu.memory_space<vmem>>, vector<4418x64xf32>
    tpu.vector_store %arg4[%c0_6, %c0_7], %7 {strides = array<i32>} : memref<4418x64xf32, #tpu.memory_space<vmem>>, vector<4418x64xf32>,
    return
  }
  func.func @transform_0(%arg0: i32) -> (i32, i32) {
    %c0_i32 = arith.constant 0 : i32
    %c0_i32_0 = arith.constant 0 : i32
    %c0_i32_1 = arith.constant 0 : i32
    return %c0_i32, %c0_i32_0 : i32, i32
  }
  func.func @transform_1(%arg0: i32) -> (i32, i32) {
    %c0_i32 = arith.constant 0 : i32
    %c0_i32_0 = arith.constant 0 : i32
    %c0_i32_1 = arith.constant 0 : i32
    return %c0_i32, %c0_i32_0 : i32, i32
  }
  func.func @transform_2(%arg0: i32) -> (i32, i32) {
    %c0_i32 = arith.constant 0 : i32
    %c0_i32_0 = arith.constant 0 : i32
    %c0_i32_1 = arith.constant 0 : i32
    return %c0_i32, %c0_i32_0 : i32, i32
  }
  func.func @transform_3(%arg0: i32) -> (i32, i32) {
    %c0_i32 = arith.constant 0 : i32
    %c0_i32_0 = arith.constant 0 : i32
    %c0_i32_1 = arith.constant 0 : i32
    return %c0_i32, %c0_i32_0 : i32, i32
  }
}

module attributes {stable_mosaic.version = 11 : i64} {
  func.func @_max_over_taps_kernel(%arg0: i32, %arg1: memref<9x1058x64xf32, #tpu.memory_space<vmem>>, %arg2: memref<1058x64xf32, #tpu.memory_space<vmem>>) attributes {dimension_semantics = [#tpu.dimension_semantics<arbitrary>], iteration_bounds = array<i64: 1>, scalar_prefetch = 0 : i64, scratch_operands = 0 : i64, tpu.core_type = #tpu.core_type<tc>, window_params = [{pipeline_mode = #tpu.pipeline_mode<synchronous>, transform_indices = @transform_0, window_bounds = array<i64: 9, 1058, 64>}, {pipeline_mode = #tpu.pipeline_mode<synchronous>, transform_indices = @transform_1, window_bounds = array<i64: 1058, 64>}]} {
    %c0 = arith.constant 0 : index
    %c0_0 = arith.constant 0 : index
    %c0_1 = arith.constant 0 : index
    %0 = vector.load %arg1[%c0, %c0_0, %c0_1] : memref<9x1058x64xf32, #tpu.memory_space<vmem>>, vector<9x1058x64xf32>
    %cst = arith.constant dense<0xFF800000> : vector<1058x64xf32>
    %1 = vector.multi_reduction <maximumf>, %0, %cst [0] : vector<9x1058x64xf32> to vector<1058x64xf32>
    %c0_2 = arith.constant 0 : index
    %c0_3 = arith.constant 0 : index
    %2 = vector.load %arg2[%c0_2, %c0_3] : memref<1058x64xf32, #tpu.memory_space<vmem>>, vector<1058x64xf32>
    tpu.vector_store %arg2[%c0_2, %c0_3], %1 {strides = array<i32>} : memref<1058x64xf32, #tpu.memory_space<vmem>>, vector<1058x64xf32>,
    return
  }
  func.func @transform_0(%arg0: i32) -> (i32, i32, i32) {
    %c0_i32 = arith.constant 0 : i32
    %c0_i32_0 = arith.constant 0 : i32
    %c0_i32_1 = arith.constant 0 : i32
    %c0_i32_2 = arith.constant 0 : i32
    return %c0_i32, %c0_i32_0, %c0_i32_1 : i32, i32, i32
  }
  func.func @transform_1(%arg0: i32) -> (i32, i32) {
    %c0_i32 = arith.constant 0 : i32
    %c0_i32_0 = arith.constant 0 : i32
    %c0_i32_1 = arith.constant 0 : i32
    return %c0_i32, %c0_i32_0 : i32, i32
  }
}

module attributes {stable_mosaic.version = 11 : i64} {
  func.func @_matmul_bias_act_kernel(%arg0: i32, %arg1: memref<242x576xf32, #tpu.memory_space<vmem>>, %arg2: memref<576x128xf32, #tpu.memory_space<vmem>>, %arg3: memref<1x128xf32, #tpu.memory_space<vmem>>, %arg4: memref<242x128xf32, #tpu.memory_space<vmem>>) attributes {dimension_semantics = [#tpu.dimension_semantics<arbitrary>], iteration_bounds = array<i64: 1>, scalar_prefetch = 0 : i64, scratch_operands = 0 : i64, tpu.core_type = #tpu.core_type<tc>, window_params = [{pipeline_mode = #tpu.pipeline_mode<synchronous>, transform_indices = @transform_0, window_bounds = array<i64: 242, 576>}, {pipeline_mode = #tpu.pipeline_mode<synchronous>, transform_indices = @transform_1, window_bounds = array<i64: 576, 128>}, {pipeline_mode = #tpu.pipeline_mode<synchronous>, transform_indices = @transform_2, window_bounds = array<i64: 1, 128>}, {pipeline_mode = #tpu.pipeline_mode<synchronous>, transform_indices = @transform_3, window_bounds = array<i64: 242, 128>}]} {
    %c0 = arith.constant 0 : index
    %c0_0 = arith.constant 0 : index
    %0 = vector.load %arg1[%c0, %c0_0] : memref<242x576xf32, #tpu.memory_space<vmem>>, vector<242x576xf32>
    %c0_1 = arith.constant 0 : index
    %c0_2 = arith.constant 0 : index
    %1 = vector.load %arg2[%c0_1, %c0_2] : memref<576x128xf32, #tpu.memory_space<vmem>>, vector<576x128xf32>
    %cst = arith.constant dense<0.000000e+00> : vector<242x128xf32>
    %2 = tpu.matmul %0, %1, %cst {dimension_numbers = #tpu.dot_dimension_numbers<[1], [0], [0], [1], [0, 0, 1, 1], [], []>} : vector<242x576xf32>, vector<576x128xf32>, vector<242x128xf32> -> vector<242x128xf32>
    %c0_3 = arith.constant 0 : index
    %c0_4 = arith.constant 0 : index
    %3 = vector.load %arg3[%c0_3, %c0_4] : memref<1x128xf32, #tpu.memory_space<vmem>>, vector<1x128xf32>
    %4 = vector.broadcast %3 : vector<1x128xf32> to vector<242x128xf32>
    %5 = arith.addf %2, %4 : vector<242x128xf32>
    %cst_5 = arith.constant 0.000000e+00 : f32
    %6 = vector.broadcast %cst_5 : f32 to vector<242x128xf32>
    %7 = arith.maximumf %5, %6 : vector<242x128xf32>
    %c0_6 = arith.constant 0 : index
    %c0_7 = arith.constant 0 : index
    %8 = vector.load %arg4[%c0_6, %c0_7] : memref<242x128xf32, #tpu.memory_space<vmem>>, vector<242x128xf32>
    tpu.vector_store %arg4[%c0_6, %c0_7], %7 {strides = array<i32>} : memref<242x128xf32, #tpu.memory_space<vmem>>, vector<242x128xf32>,
    return
  }
  func.func @transform_0(%arg0: i32) -> (i32, i32) {
    %c0_i32 = arith.constant 0 : i32
    %c0_i32_0 = arith.constant 0 : i32
    %c0_i32_1 = arith.constant 0 : i32
    return %c0_i32, %c0_i32_0 : i32, i32
  }
  func.func @transform_1(%arg0: i32) -> (i32, i32) {
    %c0_i32 = arith.constant 0 : i32
    %c0_i32_0 = arith.constant 0 : i32
    %c0_i32_1 = arith.constant 0 : i32
    return %c0_i32, %c0_i32_0 : i32, i32
  }
  func.func @transform_2(%arg0: i32) -> (i32, i32) {
    %c0_i32 = arith.constant 0 : i32
    %c0_i32_0 = arith.constant 0 : i32
    %c0_i32_1 = arith.constant 0 : i32
    return %c0_i32, %c0_i32_0 : i32, i32
  }
  func.func @transform_3(%arg0: i32) -> (i32, i32) {
    %c0_i32 = arith.constant 0 : i32
    %c0_i32_0 = arith.constant 0 : i32
    %c0_i32_1 = arith.constant 0 : i32
    return %c0_i32, %c0_i32_0 : i32, i32
  }
}

module attributes {stable_mosaic.version = 11 : i64} {
  func.func @_max_over_taps_kernel(%arg0: i32, %arg1: memref<9x50x128xf32, #tpu.memory_space<vmem>>, %arg2: memref<50x128xf32, #tpu.memory_space<vmem>>) attributes {dimension_semantics = [#tpu.dimension_semantics<arbitrary>], iteration_bounds = array<i64: 1>, scalar_prefetch = 0 : i64, scratch_operands = 0 : i64, tpu.core_type = #tpu.core_type<tc>, window_params = [{pipeline_mode = #tpu.pipeline_mode<synchronous>, transform_indices = @transform_0, window_bounds = array<i64: 9, 50, 128>}, {pipeline_mode = #tpu.pipeline_mode<synchronous>, transform_indices = @transform_1, window_bounds = array<i64: 50, 128>}]} {
    %c0 = arith.constant 0 : index
    %c0_0 = arith.constant 0 : index
    %c0_1 = arith.constant 0 : index
    %0 = vector.load %arg1[%c0, %c0_0, %c0_1] : memref<9x50x128xf32, #tpu.memory_space<vmem>>, vector<9x50x128xf32>
    %cst = arith.constant dense<0xFF800000> : vector<50x128xf32>
    %1 = vector.multi_reduction <maximumf>, %0, %cst [0] : vector<9x50x128xf32> to vector<50x128xf32>
    %c0_2 = arith.constant 0 : index
    %c0_3 = arith.constant 0 : index
    %2 = vector.load %arg2[%c0_2, %c0_3] : memref<50x128xf32, #tpu.memory_space<vmem>>, vector<50x128xf32>
    tpu.vector_store %arg2[%c0_2, %c0_3], %1 {strides = array<i32>} : memref<50x128xf32, #tpu.memory_space<vmem>>, vector<50x128xf32>,
    return
  }
  func.func @transform_0(%arg0: i32) -> (i32, i32, i32) {
    %c0_i32 = arith.constant 0 : i32
    %c0_i32_0 = arith.constant 0 : i32
    %c0_i32_1 = arith.constant 0 : i32
    %c0_i32_2 = arith.constant 0 : i32
    return %c0_i32, %c0_i32_0, %c0_i32_1 : i32, i32, i32
  }
  func.func @transform_1(%arg0: i32) -> (i32, i32) {
    %c0_i32 = arith.constant 0 : i32
    %c0_i32_0 = arith.constant 0 : i32
    %c0_i32_1 = arith.constant 0 : i32
    return %c0_i32, %c0_i32_0 : i32, i32
  }
}

module attributes {stable_mosaic.version = 11 : i64} {
  func.func @_mlp_head_kernel(%arg0: i32, %arg1: memref<8x3200xf32, #tpu.memory_space<vmem>>, %arg2: memref<3200x39xf32, #tpu.memory_space<vmem>>, %arg3: memref<1x39xf32, #tpu.memory_space<vmem>>, %arg4: memref<39x10xf32, #tpu.memory_space<vmem>>, %arg5: memref<1x10xf32, #tpu.memory_space<vmem>>, %arg6: memref<10x5xf32, #tpu.memory_space<vmem>>, %arg7: memref<1x5xf32, #tpu.memory_space<vmem>>, %arg8: memref<8x5xf32, #tpu.memory_space<vmem>>) attributes {dimension_semantics = [#tpu.dimension_semantics<arbitrary>], iteration_bounds = array<i64: 1>, scalar_prefetch = 0 : i64, scratch_operands = 0 : i64, tpu.core_type = #tpu.core_type<tc>, window_params = [{pipeline_mode = #tpu.pipeline_mode<synchronous>, transform_indices = @transform_0, window_bounds = array<i64: 8, 3200>}, {pipeline_mode = #tpu.pipeline_mode<synchronous>, transform_indices = @transform_1, window_bounds = array<i64: 3200, 39>}, {pipeline_mode = #tpu.pipeline_mode<synchronous>, transform_indices = @transform_2, window_bounds = array<i64: 1, 39>}, {pipeline_mode = #tpu.pipeline_mode<synchronous>, transform_indices = @transform_3, window_bounds = array<i64: 39, 10>}, {pipeline_mode = #tpu.pipeline_mode<synchronous>, transform_indices = @transform_4, window_bounds = array<i64: 1, 10>}, {pipeline_mode = #tpu.pipeline_mode<synchronous>, transform_indices = @transform_5, window_bounds = array<i64: 10, 5>}, {pipeline_mode = #tpu.pipeline_mode<synchronous>, transform_indices = @transform_6, window_bounds = array<i64: 1, 5>}, {pipeline_mode = #tpu.pipeline_mode<synchronous>, transform_indices = @transform_7, window_bounds = array<i64: 8, 5>}]} {
    %c0 = arith.constant 0 : index
    %c0_0 = arith.constant 0 : index
    %0 = vector.load %arg1[%c0, %c0_0] : memref<8x3200xf32, #tpu.memory_space<vmem>>, vector<8x3200xf32>
    %c0_1 = arith.constant 0 : index
    %c0_2 = arith.constant 0 : index
    %1 = vector.load %arg2[%c0_1, %c0_2] : memref<3200x39xf32, #tpu.memory_space<vmem>>, vector<3200x39xf32>
    %cst = arith.constant dense<0.000000e+00> : vector<8x39xf32>
    %2 = tpu.matmul %0, %1, %cst {dimension_numbers = #tpu.dot_dimension_numbers<[1], [0], [0], [1], [0, 0, 1, 1], [], []>} : vector<8x3200xf32>, vector<3200x39xf32>, vector<8x39xf32> -> vector<8x39xf32>
    %c0_3 = arith.constant 0 : index
    %c0_4 = arith.constant 0 : index
    %3 = vector.load %arg3[%c0_3, %c0_4] : memref<1x39xf32, #tpu.memory_space<vmem>>, vector<1x39xf32>
    %4 = vector.broadcast %3 : vector<1x39xf32> to vector<8x39xf32>
    %5 = arith.addf %2, %4 : vector<8x39xf32>
    %cst_5 = arith.constant 0.000000e+00 : f32
    %6 = vector.broadcast %cst_5 : f32 to vector<8x39xf32>
    %7 = arith.maximumf %5, %6 : vector<8x39xf32>
    %c0_6 = arith.constant 0 : index
    %c0_7 = arith.constant 0 : index
    %8 = vector.load %arg4[%c0_6, %c0_7] : memref<39x10xf32, #tpu.memory_space<vmem>>, vector<39x10xf32>
    %cst_8 = arith.constant dense<0.000000e+00> : vector<8x10xf32>
    %9 = tpu.matmul %7, %8, %cst_8 {dimension_numbers = #tpu.dot_dimension_numbers<[1], [0], [0], [1], [0, 0, 1, 1], [], []>} : vector<8x39xf32>, vector<39x10xf32>, vector<8x10xf32> -> vector<8x10xf32>
    %c0_9 = arith.constant 0 : index
    %c0_10 = arith.constant 0 : index
    %10 = vector.load %arg5[%c0_9, %c0_10] : memref<1x10xf32, #tpu.memory_space<vmem>>, vector<1x10xf32>
    %11 = vector.broadcast %10 : vector<1x10xf32> to vector<8x10xf32>
    %12 = arith.addf %9, %11 : vector<8x10xf32>
    %cst_11 = arith.constant 0.000000e+00 : f32
    %13 = vector.broadcast %cst_11 : f32 to vector<8x10xf32>
    %14 = arith.maximumf %12, %13 : vector<8x10xf32>
    %c0_12 = arith.constant 0 : index
    %c0_13 = arith.constant 0 : index
    %15 = vector.load %arg6[%c0_12, %c0_13] : memref<10x5xf32, #tpu.memory_space<vmem>>, vector<10x5xf32>
    %cst_14 = arith.constant dense<0.000000e+00> : vector<8x5xf32>
    %16 = tpu.matmul %14, %15, %cst_14 {dimension_numbers = #tpu.dot_dimension_numbers<[1], [0], [0], [1], [0, 0, 1, 1], [], []>} : vector<8x10xf32>, vector<10x5xf32>, vector<8x5xf32> -> vector<8x5xf32>
    %c0_15 = arith.constant 0 : index
    %c0_16 = arith.constant 0 : index
    %17 = vector.load %arg7[%c0_15, %c0_16] : memref<1x5xf32, #tpu.memory_space<vmem>>, vector<1x5xf32>
    %18 = vector.broadcast %17 : vector<1x5xf32> to vector<8x5xf32>
    %19 = arith.addf %16, %18 : vector<8x5xf32>
    %20 = math.absf %19 : vector<8x5xf32>
    %cst_17 = arith.constant 0.000000e+00 : f32
    %21 = vector.broadcast %cst_17 : f32 to vector<8x5xf32>
    %22 = arith.subf %21, %20 : vector<8x5xf32>
    %23 = math.exp %22 : vector<8x5xf32>
    %cst_18 = arith.constant 1.000000e+00 : f32
    %24 = vector.broadcast %cst_18 : f32 to vector<8x5xf32>
    %25 = arith.addf %24, %23 : vector<8x5xf32>
    %cst_19 = arith.constant 1.000000e+00 : f32
    %26 = vector.broadcast %cst_19 : f32 to vector<8x5xf32>
    %27 = arith.divf %26, %25 : vector<8x5xf32>
    %cst_20 = arith.constant 0.000000e+00 : f32
    %28 = vector.broadcast %cst_20 : f32 to vector<8x5xf32>
    %29 = arith.cmpf oge, %19, %28 : vector<8x5xf32>
    %cst_21 = arith.constant 1.000000e+00 : f32
    %30 = vector.broadcast %cst_21 : f32 to vector<8x5xf32>
    %31 = arith.subf %30, %27 : vector<8x5xf32>
    %32 = arith.select %29, %27, %31 : vector<8x5xi1>, vector<8x5xf32>
    %c0_22 = arith.constant 0 : index
    %c0_23 = arith.constant 0 : index
    %33 = vector.load %arg8[%c0_22, %c0_23] : memref<8x5xf32, #tpu.memory_space<vmem>>, vector<8x5xf32>
    tpu.vector_store %arg8[%c0_22, %c0_23], %32 {strides = array<i32>} : memref<8x5xf32, #tpu.memory_space<vmem>>, vector<8x5xf32>,
    return
  }
  func.func @transform_0(%arg0: i32) -> (i32, i32) {
    %c0_i32 = arith.constant 0 : i32
    %c0_i32_0 = arith.constant 0 : i32
    %c0_i32_1 = arith.constant 0 : i32
    return %c0_i32, %c0_i32_0 : i32, i32
  }
  func.func @transform_1(%arg0: i32) -> (i32, i32) {
    %c0_i32 = arith.constant 0 : i32
    %c0_i32_0 = arith.constant 0 : i32
    %c0_i32_1 = arith.constant 0 : i32
    return %c0_i32, %c0_i32_0 : i32, i32
  }
  func.func @transform_2(%arg0: i32) -> (i32, i32) {
    %c0_i32 = arith.constant 0 : i32
    %c0_i32_0 = arith.constant 0 : i32
    %c0_i32_1 = arith.constant 0 : i32
    return %c0_i32, %c0_i32_0 : i32, i32
  }
  func.func @transform_3(%arg0: i32) -> (i32, i32) {
    %c0_i32 = arith.constant 0 : i32
    %c0_i32_0 = arith.constant 0 : i32
    %c0_i32_1 = arith.constant 0 : i32
    return %c0_i32, %c0_i32_0 : i32, i32
  }
  func.func @transform_4(%arg0: i32) -> (i32, i32) {
    %c0_i32 = arith.constant 0 : i32
    %c0_i32_0 = arith.constant 0 : i32
    %c0_i32_1 = arith.constant 0 : i32
    return %c0_i32, %c0_i32_0 : i32, i32
  }
  func.func @transform_5(%arg0: i32) -> (i32, i32) {
    %c0_i32 = arith.constant 0 : i32
    %c0_i32_0 = arith.constant 0 : i32
    %c0_i32_1 = arith.constant 0 : i32
    return %c0_i32, %c0_i32_0 : i32, i32
  }
  func.func @transform_6(%arg0: i32) -> (i32, i32) {
    %c0_i32 = arith.constant 0 : i32
    %c0_i32_0 = arith.constant 0 : i32
    %c0_i32_1 = arith.constant 0 : i32
    return %c0_i32, %c0_i32_0 : i32, i32
  }
  func.func @transform_7(%arg0: i32) -> (i32, i32) {
    %c0_i32 = arith.constant 0 : i32
    %c0_i32_0 = arith.constant 0 : i32
    %c0_i32_1 = arith.constant 0 : i32
    return %c0_i32, %c0_i32_0 : i32, i32
  }
}

</mosaic_0001>

<llo_original>
// kernel: alexnet_forward_pallas.5
$region0: #{alexnet_forward_pallas.5}
  #allocation0 [shape = 'u32[]', space=smem, size = 0x4, offset = 0x4, fixed_abs, tag = 'smem constant byte address 0x4 - core index']
  #allocation1 [shape = 'u32[144,128]{1,0:T(1,128)}', space=vmem, size = 0x12000, scoped, tag = 'internal scratch']
  %s0 = inlined_call_operand.vmem [shape: f32[4418,27], index: 0, kind: input, shape index: {}]
  %s1 = inlined_call_operand.vmem [shape: f32[27,64], index: 1, kind: input, shape index: {}]
  %s2 = inlined_call_operand.vmem [shape: f32[1,64], index: 2, kind: input, shape index: {}]
  %s3 = inlined_call_operand.vmem [shape: f32[4418,64], index: 3, kind: output, shape index: {}]
  %s4 = sld [smem:[#allocation0]]
  $region22: #{alexnet_forward_pallas.5} parent=0
    _
  %s6 = ssub.s32 1, %s4
  %s7 = scalar_select 0, %s6, %s4
  // Predicated region
  $region2: #{alexnet_forward_pallas.5} parent=0 // pred_check
    _
  $region3: #{alexnet_forward_pallas.5} parent=0 // pred_check_branch
    %9 = sbr.rel (0) target = $region5
  $region4: #{alexnet_forward_pallas.5} parent=0 // pred_region
    _
  $region5: #{alexnet_forward_pallas.5} parent=0 // pred_fallthru
    _
  // Predicated region
  $region6: #{alexnet_forward_pallas.5} parent=0 // pred_check
    _
  $region7: #{alexnet_forward_pallas.5} parent=0 // pred_check_branch
    %11 = sbr.rel (0) target = $region9
  $region8: #{alexnet_forward_pallas.5} parent=0 // pred_region
    _
  $region9: #{alexnet_forward_pallas.5} parent=0 // pred_fallthru
    _
  // Predicated region
  $region10: #{alexnet_forward_pallas.5} parent=0 // pred_check
    _
  $region11: #{alexnet_forward_pallas.5} parent=0 // pred_check_branch
    %13 = sbr.rel (0) target = $region13
  $region12: #{alexnet_forward_pallas.5} parent=0 // pred_region
    _
  $region13: #{alexnet_forward_pallas.5} parent=0 // pred_fallthru
    _
  %v14 = vld [vmem:[%s0] sm:$0xff]
  %v15 = vld [vmem:[%s0 + $0x8] sm:$0xff]
  %v16 = vld [vmem:[%s0 + $0x10] sm:$0xff]
  %v17 = vld [vmem:[%s0 + $0x18] sm:$0xff]
  %v18 = vld [vmem:[%s0 + $0x20] sm:$0xff]
  %v19 = vld [vmem:[%s0 + $0x28] sm:$0xff]
  %v20 = vld [vmem:[%s0 + $0x30] sm:$0xff]
  %v21 = vld [vmem:[%s0 + $0x38] sm:$0xff]
  %v22 = vld [vmem:[%s0 + $0x40] sm:$0xff]
  %v23 = vld [vmem:[%s0 + $0x48] sm:$0xff]
  %v24 = vld [vmem:[%s0 + $0x50] sm:$0xff]
  %v25 = vld [vmem:[%s0 + $0x58] sm:$0xff]
  %v26 = vld [vmem:[%s0 + $0x60] sm:$0xff]
  %v27 = vld [vmem:[%s0 + $0x68] sm:$0xff]
  %v28 = vld [vmem:[%s0 + $0x70] sm:$0xff]
  %v29 = vld [vmem:[%s0 + $0x78] sm:$0xff]
  %v30 = vld [vmem:[%s0 + $0x80] sm:$0xff]
  %v31 = vld [vmem:[%s0 + $0x88] sm:$0xff]
  %v32 = vld [vmem:[%s0 + $0x90] sm:$0xff]
  %v33 = vld [vmem:[%s0 + $0x98] sm:$0xff]
  %v34 = vld [vmem:[%s0 + $0xa0] sm:$0xff]
  %v35 = vld [vmem:[%s0 + $0xa8] sm:$0xff]
  %v36 = vld [vmem:[%s0 + $0xb0] sm:$0xff]
  %v37 = vld [vmem:[%s0 + $0xb8] sm:$0xff]
  %v38 = vld [vmem:[%s0 + $0xc0] sm:$0xff]
  %v39 = vld [vmem:[%s0 + $0xc8] sm:$0xff]
  %v40 = vld [vmem:[%s0 + $0xd0] sm:$0xff]
  %v41 = vld [vmem:[%s0 + $0xd8] sm:$0xff]
  %v42 = vld [vmem:[%s0 + $0xe0] sm:$0xff]
  %v43 = vld [vmem:[%s0 + $0xe8] sm:$0xff]
  %v44 = vld [vmem:[%s0 + $0xf0] sm:$0xff]
  %v45 = vld [vmem:[%s0 + $0xf8] sm:$0xff]
  %v46 = vld [vmem:[%s0 + $0x100] sm:$0xff]
  %v47 = vld [vmem:[%s0 + $0x108] sm:$0xff]
  %v48 = vld [vmem:[%s0 + $0x110] sm:$0xff]
  %v49 = vld [vmem:[%s0 + $0x118] sm:$0xff]
  %v50 = vld [vmem:[%s0 + $0x120] sm:$0xff]
  %v51 = vld [vmem:[%s0 + $0x128] sm:$0xff]
  %v52 = vld [vmem:[%s0 + $0x130] sm:$0xff]
  %v53 = vld [vmem:[%s0 + $0x138] sm:$0xff]
  %v54 = vld [vmem:[%s0 + $0x140] sm:$0xff]
  %v55 = vld [vmem:[%s0 + $0x148] sm:$0xff]
  %v56 = vld [vmem:[%s0 + $0x150] sm:$0xff]
  %v57 = vld [vmem:[%s0 + $0x158] sm:$0xff]
  %v58 = vld [vmem:[%s0 + $0x160] sm:$0xff]
  %v59 = vld [vmem:[%s0 + $0x168] sm:$0xff]
  %v60 = vld [vmem:[%s0 + $0x170] sm:$0xff]
  %v61 = vld [vmem:[%s0 + $0x178] sm:$0xff]
  %v62 = vld [vmem:[%s0 + $0x180] sm:$0xff]
  %v63 = vld [vmem:[%s0 + $0x188] sm:$0xff]
  %v64 = vld [vmem:[%s0 + $0x190] sm:$0xff]
  %v65 = vld [vmem:[%s0 + $0x198] sm:$0xff]
  %v66 = vld [vmem:[%s0 + $0x1a0] sm:$0xff]
  %v67 = vld [vmem:[%s0 + $0x1a8] sm:$0xff]
  %v68 = vld [vmem:[%s0 + $0x1b0] sm:$0xff]
  %v69 = vld [vmem:[%s0 + $0x1b8] sm:$0xff]
  %v70 = vld [vmem:[%s0 + $0x1c0] sm:$0xff]
  %v71 = vld [vmem:[%s0 + $0x1c8] sm:$0xff]
  %v72 = vld [vmem:[%s0 + $0x1d0] sm:$0xff]
  %v73 = vld [vmem:[%s0 + $0x1d8] sm:$0xff]
  %v74 = vld [vmem:[%s0 + $0x1e0] sm:$0xff]
  %v75 = vld [vmem:[%s0 + $0x1e8] sm:$0xff]
  %v76 = vld [vmem:[%s0 + $0x1f0] sm:$0xff]
  %v77 = vld [vmem:[%s0 + $0x1f8] sm:$0xff]
  %v78 = vld [vmem:[%s0 + $0x200] sm:$0xff]
  %v79 = vld [vmem:[%s0 + $0x208] sm:$0xff]
  %v80 = vld [vmem:[%s0 + $0x210] sm:$0xff]
  %v81 = vld [vmem:[%s0 + $0x218] sm:$0xff]
  %v82 = vld [vmem:[%s0 + $0x220] sm:$0xff]
  %v83 = vld [vmem:[%s0 + $0x228] sm:$0xff]
  %v84 = vld [vmem:[%s0 + $0x230] sm:$0xff]
  %v85 = vld [vmem:[%s0 + $0x238] sm:$0xff]
  %v86 = vld [vmem:[%s0 + $0x240] sm:$0xff]
  %v87 = vld [vmem:[%s0 + $0x248] sm:$0xff]
  %v88 = vld [vmem:[%s0 + $0x250] sm:$0xff]
  %v89 = vld [vmem:[%s0 + $0x258] sm:$0xff]
  %v90 = vld [vmem:[%s0 + $0x260] sm:$0xff]
  %v91 = vld [vmem:[%s0 + $0x268] sm:$0xff]
  %v92 = vld [vmem:[%s0 + $0x270] sm:$0xff]
  %v93 = vld [vmem:[%s0 + $0x278] sm:$0xff]
  %v94 = vld [vmem:[%s0 + $0x280] sm:$0xff]
  %v95 = vld [vmem:[%s0 + $0x288] sm:$0xff]
  %v96 = vld [vmem:[%s0 + $0x290] sm:$0xff]
  %v97 = vld [vmem:[%s0 + $0x298] sm:$0xff]
  %v98 = vld [vmem:[%s0 + $0x2a0] sm:$0xff]
  %v99 = vld [vmem:[%s0 + $0x2a8] sm:$0xff]
  %v100 = vld [vmem:[%s0 + $0x2b0] sm:$0xff]
  %v101 = vld [vmem:[%s0 + $0x2b8] sm:$0xff]
  %v102 = vld [vmem:[%s0 + $0x2c0] sm:$0xff]
  %v103 = vld [vmem:[%s0 + $0x2c8] sm:$0xff]
  %v104 = vld [vmem:[%s0 + $0x2d0] sm:$0xff]
  %v105 = vld [vmem:[%s0 + $0x2d8] sm:$0xff]
  %v106 = vld [vmem:[%s0 + $0x2e0] sm:$0xff]
  %v107 = vld [vmem:[%s0 + $0x2e8] sm:$0xff]
  %v108 = vld [vmem:[%s0 + $0x2f0] sm:$0xff]
  %v109 = vld [vmem:[%s0 + $0x2f8] sm:$0xff]
  %v110 = vld [vmem:[%s0 + $0x300] sm:$0xff]
  %v111 = vld [vmem:[%s0 + $0x308] sm:$0xff]
  %v112 = vld [vmem:[%s0 + $0x310] sm:$0xff]
  %v113 = vld [vmem:[%s0 + $0x318] sm:$0xff]
  %v114 = vld [vmem:[%s0 + $0x320] sm:$0xff]
  %v115 = vld [vmem:[%s0 + $0x328] sm:$0xff]
  %v116 = vld [vmem:[%s0 + $0x330] sm:$0xff]
  %v117 = vld [vmem:[%s0 + $0x338] sm:$0xff]
  %v118 = vld [vmem:[%s0 + $0x340] sm:$0xff]
  %v119 = vld [vmem:[%s0 + $0x348] sm:$0xff]
  %v120 = vld [vmem:[%s0 + $0x350] sm:$0xff]
  %v121 = vld [vmem:[%s0 + $0x358] sm:$0xff]
  %v122 = vld [vmem:[%s0 + $0x360] sm:$0xff]
  %v123 = vld [vmem:[%s0 + $0x368] sm:$0xff]
  %v124 = vld [vmem:[%s0 + $0x370] sm:$0xff]
  %v125 = vld [vmem:[%s0 + $0x378] sm:$0xff]
  %v126 = vld [vmem:[%s0 + $0x380] sm:$0xff]
  %v127 = vld [vmem:[%s0 + $0x388] sm:$0xff]
  %v128 = vld [vmem:[%s0 + $0x390] sm:$0xff]
  %v129 = vld [vmem:[%s0 + $0x398] sm:$0xff]
  %v130 = vld [vmem:[%s0 + $0x3a0] sm:$0xff]
  %v131 = vld [vmem:[%s0 + $0x3a8] sm:$0xff]
  %v132 = vld [vmem:[%s0 + $0x3b0] sm:$0xff]
  %v133 = vld [vmem:[%s0 + $0x3b8] sm:$0xff]
  %v134 = vld [vmem:[%s0 + $0x3c0] sm:$0xff]
  %v135 = vld [vmem:[%s0 + $0x3c8] sm:$0xff]
  %v136 = vld [vmem:[%s0 + $0x3d0] sm:$0xff]
  %v137 = vld [vmem:[%s0 + $0x3d8] sm:$0xff]
  %v138 = vld [vmem:[%s0 + $0x3e0] sm:$0xff]
  %v139 = vld [vmem:[%s0 + $0x3e8] sm:$0xff]
  %v140 = vld [vmem:[%s0 + $0x3f0] sm:$0xff]
  %v141 = vld [vmem:[%s0 + $0x3f8] sm:$0xff]
  %v142 = vld [vmem:[%s0 + $0x400] sm:$0xff]
  %v143 = vld [vmem:[%s0 + $0x408] sm:$0xff]
  %v144 = vld [vmem:[%s0 + $0x410] sm:$0xff]
  %v145 = vld [vmem:[%s0 + $0x418] sm:$0xff]
  %v146 = vld [vmem:[%s0 + $0x420] sm:$0xff]
  %v147 = vld [vmem:[%s0 + $0x428] sm:$0xff]
  %v148 = vld [vmem:[%s0 + $0x430] sm:$0xff]
  %v149 = vld [vmem:[%s0 + $0x438] sm:$0xff]
  %v150 = vld [vmem:[%s0 + $0x440] sm:$0xff]
  %v151 = vld [vmem:[%s0 + $0x448] sm:$0xff]
  %v152 = vld [vmem:[%s0 + $0x450] sm:$0xff]
  %v153 = vld [vmem:[%s0 + $0x458] sm:$0xff]
  %v154 = vld [vmem:[%s0 + $0x460] sm:$0xff]
  %v155 = vld [vmem:[%s0 + $0x468] sm:$0xff]
  %v156 = vld [vmem:[%s0 + $0x470] sm:$0xff]
  %v157 = vld [vmem:[%s0 + $0x478] sm:$0xff]
  %v158 = vld [vmem:[%s0 + $0x480] sm:$0xff]
  %v159 = vld [vmem:[%s0 + $0x488] sm:$0xff]
  %v160 = vld [vmem:[%s0 + $0x490] sm:$0xff]
  %v161 = vld [vmem:[%s0 + $0x498] sm:$0xff]
  %v162 = vld [vmem:[%s0 + $0x4a0] sm:$0xff]
  %v163 = vld [vmem:[%s0 + $0x4a8] sm:$0xff]
  %v164 = vld [vmem:[%s0 + $0x4b0] sm:$0xff]
  %v165 = vld [vmem:[%s0 + $0x4b8] sm:$0xff]
  %v166 = vld [vmem:[%s0 + $0x4c0] sm:$0xff]
  %v167 = vld [vmem:[%s0 + $0x4c8] sm:$0xff]
  %v168 = vld [vmem:[%s0 + $0x4d0] sm:$0xff]
  %v169 = vld [vmem:[%s0 + $0x4d8] sm:$0xff]
  %v170 = vld [vmem:[%s0 + $0x4e0] sm:$0xff]
  %v171 = vld [vmem:[%s0 + $0x4e8] sm:$0xff]
  %v172 = vld [vmem:[%s0 + $0x4f0] sm:$0xff]
  %v173 = vld [vmem:[%s0 + $0x4f8] sm:$0xff]
  %v174 = vld [vmem:[%s0 + $0x500] sm:$0xff]
  %v175 = vld [vmem:[%s0 + $0x508] sm:$0xff]
  %v176 = vld [vmem:[%s0 + $0x510] sm:$0xff]
  %v177 = vld [vmem:[%s0 + $0x518] sm:$0xff]
  %v178 = vld [vmem:[%s0 + $0x520] sm:$0xff]
  %v179 = vld [vmem:[%s0 + $0x528] sm:$0xff]
  %v180 = vld [vmem:[%s0 + $0x530] sm:$0xff]
  %v181 = vld [vmem:[%s0 + $0x538] sm:$0xff]
  %v182 = vld [vmem:[%s0 + $0x540] sm:$0xff]
  %v183 = vld [vmem:[%s0 + $0x548] sm:$0xff]
  %v184 = vld [vmem:[%s0 + $0x550] sm:$0xff]
  %v185 = vld [vmem:[%s0 + $0x558] sm:$0xff]
  %v186 = vld [vmem:[%s0 + $0x560] sm:$0xff]
  %v187 = vld [vmem:[%s0 + $0x568] sm:$0xff]
  %v188 = vld [vmem:[%s0 + $0x570] sm:$0xff]
  %v189 = vld [vmem:[%s0 + $0x578] sm:$0xff]
  %v190 = vld [vmem:[%s0 + $0x580] sm:$0xff]
  %v191 = vld [vmem:[%s0 + $0x588] sm:$0xff]
  %v192 = vld [vmem:[%s0 + $0x590] sm:$0xff]
  %v193 = vld [vmem:[%s0 + $0x598] sm:$0xff]
  %v194 = vld [vmem:[%s0 + $0x5a0] sm:$0xff]
  %v195 = vld [vmem:[%s0 + $0x5a8] sm:$0xff]
  %v196 = vld [vmem:[%s0 + $0x5b0] sm:$0xff]
  %v197 = vld [vmem:[%s0 + $0x5b8] sm:$0xff]
  %v198 = vld [vmem:[%s0 + $0x5c0] sm:$0xff]
  %v199 = vld [vmem:[%s0 + $0x5c8] sm:$0xff]
  %v200 = vld [vmem:[%s0 + $0x5d0] sm:$0xff]
  %v201 = vld [vmem:[%s0 + $0x5d8] sm:$0xff]
  %v202 = vld [vmem:[%s0 + $0x5e0] sm:$0xff]
  %v203 = vld [vmem:[%s0 + $0x5e8] sm:$0xff]
  %v204 = vld [vmem:[%s0 + $0x5f0] sm:$0xff]
  %v205 = vld [vmem:[%s0 + $0x5f8] sm:$0xff]
  %v206 = vld [vmem:[%s0 + $0x600] sm:$0xff]
  %v207 = vld [vmem:[%s0 + $0x608] sm:$0xff]
  %v208 = vld [vmem:[%s0 + $0x610] sm:$0xff]
  %v209 = vld [vmem:[%s0 + $0x618] sm:$0xff]
  %v210 = vld [vmem:[%s0 + $0x620] sm:$0xff]
  %v211 = vld [vmem:[%s0 + $0x628] sm:$0xff]
  %v212 = vld [vmem:[%s0 + $0x630] sm:$0xff]
  %v213 = vld [vmem:[%s0 + $0x638] sm:$0xff]
  %v214 = vld [vmem:[%s0 + $0x640] sm:$0xff]
  %v215 = vld [vmem:[%s0 + $0x648] sm:$0xff]
  %v216 = vld [vmem:[%s0 + $0x650] sm:$0xff]
  %v217 = vld [vmem:[%s0 + $0x658] sm:$0xff]
  %v218 = vld [vmem:[%s0 + $0x660] sm:$0xff]
  %v219 = vld [vmem:[%s0 + $0x668] sm:$0xff]
  %v220 = vld [vmem:[%s0 + $0x670] sm:$0xff]
  %v221 = vld [vmem:[%s0 + $0x678] sm:$0xff]
  %v222 = vld [vmem:[%s0 + $0x680] sm:$0xff]
  %v223 = vld [vmem:[%s0 + $0x688] sm:$0xff]
  %v224 = vld [vmem:[%s0 + $0x690] sm:$0xff]
  %v225 = vld [vmem:[%s0 + $0x698] sm:$0xff]
  %v226 = vld [vmem:[%s0 + $0x6a0] sm:$0xff]
  %v227 = vld [vmem:[%s0 + $0x6a8] sm:$0xff]
  %v228 = vld [vmem:[%s0 + $0x6b0] sm:$0xff]
  %v229 = vld [vmem:[%s0 + $0x6b8] sm:$0xff]
  %v230 = vld [vmem:[%s0 + $0x6c0] sm:$0xff]
  %v231 = vld [vmem:[%s0 + $0x6c8] sm:$0xff]
  %v232 = vld [vmem:[%s0 + $0x6d0] sm:$0xff]
  %v233 = vld [vmem:[%s0 + $0x6d8] sm:$0xff]
  %v234 = vld [vmem:[%s0 + $0x6e0] sm:$0xff]
  %v235 = vld [vmem:[%s0 + $0x6e8] sm:$0xff]
  %v236 = vld [vmem:[%s0 + $0x6f0] sm:$0xff]
  %v237 = vld [vmem:[%s0 + $0x6f8] sm:$0xff]
  %v238 = vld [vmem:[%s0 + $0x700] sm:$0xff]
  %v239 = vld [vmem:[%s0 + $0x708] sm:$0xff]
  %v240 = vld [vmem:[%s0 + $0x710] sm:$0xff]
  %v241 = vld [vmem:[%s0 + $0x718] sm:$0xff]
  %v242 = vld [vmem:[%s0 + $0x720] sm:$0xff]
  %v243 = vld [vmem:[%s0 + $0x728] sm:$0xff]
  %v244 = vld [vmem:[%s0 + $0x730] sm:$0xff]
  %v245 = vld [vmem:[%s0 + $0x738] sm:$0xff]
  %v246 = vld [vmem:[%s0 + $0x740] sm:$0xff]
  %v247 = vld [vmem:[%s0 + $0x748] sm:$0xff]
  %v248 = vld [vmem:[%s0 + $0x750] sm:$0xff]
  %v249 = vld [vmem:[%s0 + $0x758] sm:$0xff]
  %v250 = vld [vmem:[%s0 + $0x760] sm:$0xff]
  %v251 = vld [vmem:[%s0 + $0x768] sm:$0xff]
  %v252 = vld [vmem:[%s0 + $0x770] sm:$0xff]
  %v253 = vld [vmem:[%s0 + $0x778] sm:$0xff]
  %v254 = vld [vmem:[%s0 + $0x780] sm:$0xff]
  %v255 = vld [vmem:[%s0 + $0x788] sm:$0xff]
  %v256 = vld [vmem:[%s0 + $0x790] sm:$0xff]
  %v257 = vld [vmem:[%s0 + $0x798] sm:$0xff]
  %v258 = vld [vmem:[%s0 + $0x7a0] sm:$0xff]
  %v259 = vld [vmem:[%s0 + $0x7a8] sm:$0xff]
  %v260 = vld [vmem:[%s0 + $0x7b0] sm:$0xff]
  %v261 = vld [vmem:[%s0 + $0x7b8] sm:$0xff]
  %v262 = vld [vmem:[%s0 + $0x7c0] sm:$0xff]
  %v263 = vld [vmem:[%s0 + $0x7c8] sm:$0xff]
  %v264 = vld [vmem:[%s0 + $0x7d0] sm:$0xff]
  %v265 = vld [vmem:[%s0 + $0x7d8] sm:$0xff]
  %v266 = vld [vmem:[%s0 + $0x7e0] sm:$0xff]
  %v267 = vld [vmem:[%s0 + $0x7e8] sm:$0xff]
  %v268 = vld [vmem:[%s0 + $0x7f0] sm:$0xff]
  %v269 = vld [vmem:[%s0 + $0x7f8] sm:$0xff]
  %v270 = vld [vmem:[%s0 + $0x800] sm:$0xff]
  %v271 = vld [vmem:[%s0 + $0x808] sm:$0xff]
  %v272 = vld [vmem:[%s0 + $0x810] sm:$0xff]
  %v273 = vld [vmem:[%s0 + $0x818] sm:$0xff]
  %v274 = vld [vmem:[%s0 + $0x820] sm:$0xff]
  %v275 = vld [vmem:[%s0 + $0x828] sm:$0xff]
  %v276 = vld [vmem:[%s0 + $0x830] sm:$0xff]
  %v277 = vld [vmem:[%s0 + $0x838] sm:$0xff]
  %v278 = vld [vmem:[%s0 + $0x840] sm:$0xff]
  %v279 = vld [vmem:[%s0 + $0x848] sm:$0xff]
  %v280 = vld [vmem:[%s0 + $0x850] sm:$0xff]
  %v281 = vld [vmem:[%s0 + $0x858] sm:$0xff]
  %v282 = vld [vmem:[%s0 + $0x860] sm:$0xff]
  %v283 = vld [vmem:[%s0 + $0x868] sm:$0xff]
  %v284 = vld [vmem:[%s0 + $0x870] sm:$0xff]
  %v285 = vld [vmem:[%s0 + $0x878] sm:$0xff]
  %v286 = vld [vmem:[%s0 + $0x880] sm:$0xff]
  %v287 = vld [vmem:[%s0 + $0x888] sm:$0xff]
  %v288 = vld [vmem:[%s0 + $0x890] sm:$0xff]
  %v289 = vld [vmem:[%s0 + $0x898] sm:$0xff]
  %v290 = vld [vmem:[%s0 + $0x8a0] sm:$0xff]
  %v291 = vld [vmem:[%s0 + $0x8a8] sm:$0xff]
  %v292 = vld [vmem:[%s0 + $0x8b0] sm:$0xff]
  %v293 = vld [vmem:[%s0 + $0x8b8] sm:$0xff]
  %v294 = vld [vmem:[%s0 + $0x8c0] sm:$0xff]
  %v295 = vld [vmem:[%s0 + $0x8c8] sm:$0xff]
  %v296 = vld [vmem:[%s0 + $0x8d0] sm:$0xff]
  %v297 = vld [vmem:[%s0 + $0x8d8] sm:$0xff]
  %v298 = vld [vmem:[%s0 + $0x8e0] sm:$0xff]
  %v299 = vld [vmem:[%s0 + $0x8e8] sm:$0xff]
  %v300 = vld [vmem:[%s0 + $0x8f0] sm:$0xff]
  %v301 = vld [vmem:[%s0 + $0x8f8] sm:$0xff]
  %v302 = vld [vmem:[%s0 + $0x900] sm:$0xff]
  %v303 = vld [vmem:[%s0 + $0x908] sm:$0xff]
  %v304 = vld [vmem:[%s0 + $0x910] sm:$0xff]
  %v305 = vld [vmem:[%s0 + $0x918] sm:$0xff]
  %v306 = vld [vmem:[%s0 + $0x920] sm:$0xff]
  %v307 = vld [vmem:[%s0 + $0x928] sm:$0xff]
  %v308 = vld [vmem:[%s0 + $0x930] sm:$0xff]
  %v309 = vld [vmem:[%s0 + $0x938] sm:$0xff]
  %v310 = vld [vmem:[%s0 + $0x940] sm:$0xff]
  %v311 = vld [vmem:[%s0 + $0x948] sm:$0xff]
  %v312 = vld [vmem:[%s0 + $0x950] sm:$0xff]
  %v313 = vld [vmem:[%s0 + $0x958] sm:$0xff]
  %v314 = vld [vmem:[%s0 + $0x960] sm:$0xff]
  %v315 = vld [vmem:[%s0 + $0x968] sm:$0xff]
  %v316 = vld [vmem:[%s0 + $0x970] sm:$0xff]
  %v317 = vld [vmem:[%s0 + $0x978] sm:$0xff]
  %v318 = vld [vmem:[%s0 + $0x980] sm:$0xff]
  %v319 = vld [vmem:[%s0 + $0x988] sm:$0xff]
  %v320 = vld [vmem:[%s0 + $0x990] sm:$0xff]
  %v321 = vld [vmem:[%s0 + $0x998] sm:$0xff]
  %v322 = vld [vmem:[%s0 + $0x9a0] sm:$0xff]
  %v323 = vld [vmem:[%s0 + $0x9a8] sm:$0xff]
  %v324 = vld [vmem:[%s0 + $0x9b0] sm:$0xff]
  %v325 = vld [vmem:[%s0 + $0x9b8] sm:$0xff]
  %v326 = vld [vmem:[%s0 + $0x9c0] sm:$0xff]
  %v327 = vld [vmem:[%s0 + $0x9c8] sm:$0xff]
  %v328 = vld [vmem:[%s0 + $0x9d0] sm:$0xff]
  %v329 = vld [vmem:[%s0 + $0x9d8] sm:$0xff]
  %v330 = vld [vmem:[%s0 + $0x9e0] sm:$0xff]
  %v331 = vld [vmem:[%s0 + $0x9e8] sm:$0xff]
  %v332 = vld [vmem:[%s0 + $0x9f0] sm:$0xff]
  %v333 = vld [vmem:[%s0 + $0x9f8] sm:$0xff]
  %v334 = vld [vmem:[%s0 + $0xa00] sm:$0xff]
  %v335 = vld [vmem:[%s0 + $0xa08] sm:$0xff]
  %v336 = vld [vmem:[%s0 + $0xa10] sm:$0xff]
  %v337 = vld [vmem:[%s0 + $0xa18] sm:$0xff]
  %v338 = vld [vmem:[%s0 + $0xa20] sm:$0xff]
  %v339 = vld [vmem:[%s0 + $0xa28] sm:$0xff]
  %v340 = vld [vmem:[%s0 + $0xa30] sm:$0xff]
  %v341 = vld [vmem:[%s0 + $0xa38] sm:$0xff]
  %v342 = vld [vmem:[%s0 + $0xa40] sm:$0xff]
  %v343 = vld [vmem:[%s0 + $0xa48] sm:$0xff]
  %v344 = vld [vmem:[%s0 + $0xa50] sm:$0xff]
  %v345 = vld [vmem:[%s0 + $0xa58] sm:$0xff]
  %v346 = vld [vmem:[%s0 + $0xa60] sm:$0xff]
  %v347 = vld [vmem:[%s0 + $0xa68] sm:$0xff]
  %v348 = vld [vmem:[%s0 + $0xa70] sm:$0xff]
  %v349 = vld [vmem:[%s0 + $0xa78] sm:$0xff]
  %v350 = vld [vmem:[%s0 + $0xa80] sm:$0xff]
  %v351 = vld [vmem:[%s0 + $0xa88] sm:$0xff]
  %v352 = vld [vmem:[%s0 + $0xa90] sm:$0xff]
  %v353 = vld [vmem:[%s0 + $0xa98] sm:$0xff]
  %v354 = vld [vmem:[%s0 + $0xaa0] sm:$0xff]
  %v355 = vld [vmem:[%s0 + $0xaa8] sm:$0xff]
  %v356 = vld [vmem:[%s0 + $0xab0] sm:$0xff]
  %v357 = vld [vmem:[%s0 + $0xab8] sm:$0xff]
  %v358 = vld [vmem:[%s0 + $0xac0] sm:$0xff]
  %v359 = vld [vmem:[%s0 + $0xac8] sm:$0xff]
  %v360 = vld [vmem:[%s0 + $0xad0] sm:$0xff]
  %v361 = vld [vmem:[%s0 + $0xad8] sm:$0xff]
  %v362 = vld [vmem:[%s0 + $0xae0] sm:$0xff]
  %v363 = vld [vmem:[%s0 + $0xae8] sm:$0xff]
  %v364 = vld [vmem:[%s0 + $0xaf0] sm:$0xff]
  %v365 = vld [vmem:[%s0 + $0xaf8] sm:$0xff]
  %v366 = vld [vmem:[%s0 + $0xb00] sm:$0xff]
  %v367 = vld [vmem:[%s0 + $0xb08] sm:$0xff]
  %v368 = vld [vmem:[%s0 + $0xb10] sm:$0xff]
  %v369 = vld [vmem:[%s0 + $0xb18] sm:$0xff]
  %v370 = vld [vmem:[%s0 + $0xb20] sm:$0xff]
  %v371 = vld [vmem:[%s0 + $0xb28] sm:$0xff]
  %v372 = vld [vmem:[%s0 + $0xb30] sm:$0xff]
  %v373 = vld [vmem:[%s0 + $0xb38] sm:$0xff]
  %v374 = vld [vmem:[%s0 + $0xb40] sm:$0xff]
  %v375 = vld [vmem:[%s0 + $0xb48] sm:$0xff]
  %v376 = vld [vmem:[%s0 + $0xb50] sm:$0xff]
  %v377 = vld [vmem:[%s0 + $0xb58] sm:$0xff]
  %v378 = vld [vmem:[%s0 + $0xb60] sm:$0xff]
  %v379 = vld [vmem:[%s0 + $0xb68] sm:$0xff]
  %v380 = vld [vmem:[%s0 + $0xb70] sm:$0xff]
  %v381 = vld [vmem:[%s0 + $0xb78] sm:$0xff]
  %v382 = vld [vmem:[%s0 + $0xb80] sm:$0xff]
  %v383 = vld [vmem:[%s0 + $0xb88] sm:$0xff]
  %v384 = vld [vmem:[%s0 + $0xb90] sm:$0xff]
  %v385 = vld [vmem:[%s0 + $0xb98] sm:$0xff]
  %v386 = vld [vmem:[%s0 + $0xba0] sm:$0xff]
  %v387 = vld [vmem:[%s0 + $0xba8] sm:$0xff]
  %v388 = vld [vmem:[%s0 + $0xbb0] sm:$0xff]
  %v389 = vld [vmem:[%s0 + $0xbb8] sm:$0xff]
  %v390 = vld [vmem:[%s0 + $0xbc0] sm:$0xff]
  %v391 = vld [vmem:[%s0 + $0xbc8] sm:$0xff]
  %v392 = vld [vmem:[%s0 + $0xbd0] sm:$0xff]
  %v393 = vld [vmem:[%s0 + $0xbd8] sm:$0xff]
  %v394 = vld [vmem:[%s0 + $0xbe0] sm:$0xff]
  %v395 = vld [vmem:[%s0 + $0xbe8] sm:$0xff]
  %v396 = vld [vmem:[%s0 + $0xbf0] sm:$0xff]
  %v397 = vld [vmem:[%s0 + $0xbf8] sm:$0xff]
  %v398 = vld [vmem:[%s0 + $0xc00] sm:$0xff]
  %v399 = vld [vmem:[%s0 + $0xc08] sm:$0xff]
  %v400 = vld [vmem:[%s0 + $0xc10] sm:$0xff]
  %v401 = vld [vmem:[%s0 + $0xc18] sm:$0xff]
  %v402 = vld [vmem:[%s0 + $0xc20] sm:$0xff]
  %v403 = vld [vmem:[%s0 + $0xc28] sm:$0xff]
  %v404 = vld [vmem:[%s0 + $0xc30] sm:$0xff]
  %v405 = vld [vmem:[%s0 + $0xc38] sm:$0xff]
  %v406 = vld [vmem:[%s0 + $0xc40] sm:$0xff]
  %v407 = vld [vmem:[%s0 + $0xc48] sm:$0xff]
  %v408 = vld [vmem:[%s0 + $0xc50] sm:$0xff]
  %v409 = vld [vmem:[%s0 + $0xc58] sm:$0xff]
  %v410 = vld [vmem:[%s0 + $0xc60] sm:$0xff]
  %v411 = vld [vmem:[%s0 + $0xc68] sm:$0xff]
  %v412 = vld [vmem:[%s0 + $0xc70] sm:$0xff]
  %v413 = vld [vmem:[%s0 + $0xc78] sm:$0xff]
  %v414 = vld [vmem:[%s0 + $0xc80] sm:$0xff]
  %v415 = vld [vmem:[%s0 + $0xc88] sm:$0xff]
  %v416 = vld [vmem:[%s0 + $0xc90] sm:$0xff]
  %v417 = vld [vmem:[%s0 + $0xc98] sm:$0xff]
  %v418 = vld [vmem:[%s0 + $0xca0] sm:$0xff]
  %v419 = vld [vmem:[%s0 + $0xca8] sm:$0xff]
  %v420 = vld [vmem:[%s0 + $0xcb0] sm:$0xff]
  %v421 = vld [vmem:[%s0 + $0xcb8] sm:$0xff]
  %v422 = vld [vmem:[%s0 + $0xcc0] sm:$0xff]
  %v423 = vld [vmem:[%s0 + $0xcc8] sm:$0xff]
  %v424 = vld [vmem:[%s0 + $0xcd0] sm:$0xff]
  %v425 = vld [vmem:[%s0 + $0xcd8] sm:$0xff]
  %v426 = vld [vmem:[%s0 + $0xce0] sm:$0xff]
  %v427 = vld [vmem:[%s0 + $0xce8] sm:$0xff]
  %v428 = vld [vmem:[%s0 + $0xcf0] sm:$0xff]
  %v429 = vld [vmem:[%s0 + $0xcf8] sm:$0xff]
  %v430 = vld [vmem:[%s0 + $0xd00] sm:$0xff]
  %v431 = vld [vmem:[%s0 + $0xd08] sm:$0xff]
  %v432 = vld [vmem:[%s0 + $0xd10] sm:$0xff]
  %v433 = vld [vmem:[%s0 + $0xd18] sm:$0xff]
  %v434 = vld [vmem:[%s0 + $0xd20] sm:$0xff]
  %v435 = vld [vmem:[%s0 + $0xd28] sm:$0xff]
  %v436 = vld [vmem:[%s0 + $0xd30] sm:$0xff]
  %v437 = vld [vmem:[%s0 + $0xd38] sm:$0xff]
  %v438 = vld [vmem:[%s0 + $0xd40] sm:$0xff]
  %v439 = vld [vmem:[%s0 + $0xd48] sm:$0xff]
  %v440 = vld [vmem:[%s0 + $0xd50] sm:$0xff]
  %v441 = vld [vmem:[%s0 + $0xd58] sm:$0xff]
  %v442 = vld [vmem:[%s0 + $0xd60] sm:$0xff]
  %v443 = vld [vmem:[%s0 + $0xd68] sm:$0xff]
  %v444 = vld [vmem:[%s0 + $0xd70] sm:$0xff]
  %v445 = vld [vmem:[%s0 + $0xd78] sm:$0xff]
  %v446 = vld [vmem:[%s0 + $0xd80] sm:$0xff]
  %v447 = vld [vmem:[%s0 + $0xd88] sm:$0xff]
  %v448 = vld [vmem:[%s0 + $0xd90] sm:$0xff]
  %v449 = vld [vmem:[%s0 + $0xd98] sm:$0xff]
  %v450 = vld [vmem:[%s0 + $0xda0] sm:$0xff]
  %v451 = vld [vmem:[%s0 + $0xda8] sm:$0xff]
  %v452 = vld [vmem:[%s0 + $0xdb0] sm:$0xff]
  %v453 = vld [vmem:[%s0 + $0xdb8] sm:$0xff]
  %v454 = vld [vmem:[%s0 + $0xdc0] sm:$0xff]
  %v455 = vld [vmem:[%s0 + $0xdc8] sm:$0xff]
  %v456 = vld [vmem:[%s0 + $0xdd0] sm:$0xff]
  %v457 = vld [vmem:[%s0 + $0xdd8] sm:$0xff]
  %v458 = vld [vmem:[%s0 + $0xde0] sm:$0xff]
  %v459 = vld [vmem:[%s0 + $0xde8] sm:$0xff]
  %v460 = vld [vmem:[%s0 + $0xdf0] sm:$0xff]
  %v461 = vld [vmem:[%s0 + $0xdf8] sm:$0xff]
  %v462 = vld [vmem:[%s0 + $0xe00] sm:$0xff]
  %v463 = vld [vmem:[%s0 + $0xe08] sm:$0xff]
  %v464 = vld [vmem:[%s0 + $0xe10] sm:$0xff]
  %v465 = vld [vmem:[%s0 + $0xe18] sm:$0xff]
  %v466 = vld [vmem:[%s0 + $0xe20] sm:$0xff]
  %v467 = vld [vmem:[%s0 + $0xe28] sm:$0xff]
  %v468 = vld [vmem:[%s0 + $0xe30] sm:$0xff]
  %v469 = vld [vmem:[%s0 + $0xe38] sm:$0xff]
  %v470 = vld [vmem:[%s0 + $0xe40] sm:$0xff]
  %v471 = vld [vmem:[%s0 + $0xe48] sm:$0xff]
  %v472 = vld [vmem:[%s0 + $0xe50] sm:$0xff]
  %v473 = vld [vmem:[%s0 + $0xe58] sm:$0xff]
  %v474 = vld [vmem:[%s0 + $0xe60] sm:$0xff]
  %v475 = vld [vmem:[%s0 + $0xe68] sm:$0xff]
  %v476 = vld [vmem:[%s0 + $0xe70] sm:$0xff]
  %v477 = vld [vmem:[%s0 + $0xe78] sm:$0xff]
  %v478 = vld [vmem:[%s0 + $0xe80] sm:$0xff]
  %v479 = vld [vmem:[%s0 + $0xe88] sm:$0xff]
  %v480 = vld [vmem:[%s0 + $0xe90] sm:$0xff]
  %v481 = vld [vmem:[%s0 + $0xe98] sm:$0xff]
  %v482 = vld [vmem:[%s0 + $0xea0] sm:$0xff]
  %v483 = vld [vmem:[%s0 + $0xea8] sm:$0xff]
  %v484 = vld [vmem:[%s0 + $0xeb0] sm:$0xff]
  %v485 = vld [vmem:[%s0 + $0xeb8] sm:$0xff]
  %v486 = vld [vmem:[%s0 + $0xec0] sm:$0xff]
  %v487 = vld [vmem:[%s0 + $0xec8] sm:$0xff]
  %v488 = vld [vmem:[%s0 + $0xed0] sm:$0xff]
  %v489 = vld [vmem:[%s0 + $0xed8] sm:$0xff]
  %v490 = vld [vmem:[%s0 + $0xee0] sm:$0xff]
  %v491 = vld [vmem:[%s0 + $0xee8] sm:$0xff]
  %v492 = vld [vmem:[%s0 + $0xef0] sm:$0xff]
  %v493 = vld [vmem:[%s0 + $0xef8] sm:$0xff]
  %v494 = vld [vmem:[%s0 + $0xf00] sm:$0xff]
  %v495 = vld [vmem:[%s0 + $0xf08] sm:$0xff]
  %v496 = vld [vmem:[%s0 + $0xf10] sm:$0xff]
  %v497 = vld [vmem:[%s0 + $0xf18] sm:$0xff]
  %v498 = vld [vmem:[%s0 + $0xf20] sm:$0xff]
  %v499 = vld [vmem:[%s0 + $0xf28] sm:$0xff]
  %v500 = vld [vmem:[%s0 + $0xf30] sm:$0xff]
  %v501 = vld [vmem:[%s0 + $0xf38] sm:$0xff]
  %v502 = vld [vmem:[%s0 + $0xf40] sm:$0xff]
  %v503 = vld [vmem:[%s0 + $0xf48] sm:$0xff]
  %v504 = vld [vmem:[%s0 + $0xf50] sm:$0xff]
  %v505 = vld [vmem:[%s0 + $0xf58] sm:$0xff]
  %v506 = vld [vmem:[%s0 + $0xf60] sm:$0xff]
  %v507 = vld [vmem:[%s0 + $0xf68] sm:$0xff]
  %v508 = vld [vmem:[%s0 + $0xf70] sm:$0xff]
  %v509 = vld [vmem:[%s0 + $0xf78] sm:$0xff]
  %v510 = vld [vmem:[%s0 + $0xf80] sm:$0xff]
  %v511 = vld [vmem:[%s0 + $0xf88] sm:$0xff]
  %v512 = vld [vmem:[%s0 + $0xf90] sm:$0xff]
  %v513 = vld [vmem:[%s0 + $0xf98] sm:$0xff]
  %v514 = vld [vmem:[%s0 + $0xfa0] sm:$0xff]
  %v515 = vld [vmem:[%s0 + $0xfa8] sm:$0xff]
  %v516 = vld [vmem:[%s0 + $0xfb0] sm:$0xff]
  %v517 = vld [vmem:[%s0 + $0xfb8] sm:$0xff]
  %v518 = vld [vmem:[%s0 + $0xfc0] sm:$0xff]
  %v519 = vld [vmem:[%s0 + $0xfc8] sm:$0xff]
  %v520 = vld [vmem:[%s0 + $0xfd0] sm:$0xff]
  %v521 = vld [vmem:[%s0 + $0xfd8] sm:$0xff]
  %v522 = vld [vmem:[%s0 + $0xfe0] sm:$0xff]
  %v523 = vld [vmem:[%s0 + $0xfe8] sm:$0xff]
  %v524 = vld [vmem:[%s0 + $0xff0] sm:$0xff]
  %v525 = vld [vmem:[%s0 + $0xff8] sm:$0xff]
  %v526 = vld [vmem:[%s0 + $0x1000] sm:$0xff]
  %v527 = vld [vmem:[%s0 + $0x1008] sm:$0xff]
  %v528 = vld [vmem:[%s0 + $0x1010] sm:$0xff]
  %v529 = vld [vmem:[%s0 + $0x1018] sm:$0xff]
  %v530 = vld [vmem:[%s0 + $0x1020] sm:$0xff]
  %v531 = vld [vmem:[%s0 + $0x1028] sm:$0xff]
  %v532 = vld [vmem:[%s0 + $0x1030] sm:$0xff]
  %v533 = vld [vmem:[%s0 + $0x1038] sm:$0xff]
  %v534 = vld [vmem:[%s0 + $0x1040] sm:$0xff]
  %v535 = vld [vmem:[%s0 + $0x1048] sm:$0xff]
  %v536 = vld [vmem:[%s0 + $0x1050] sm:$0xff]
  %v537 = vld [vmem:[%s0 + $0x1058] sm:$0xff]
  %v538 = vld [vmem:[%s0 + $0x1060] sm:$0xff]
  %v539 = vld [vmem:[%s0 + $0x1068] sm:$0xff]
  %v540 = vld [vmem:[%s0 + $0x1070] sm:$0xff]
  %v541 = vld [vmem:[%s0 + $0x1078] sm:$0xff]
  %v542 = vld [vmem:[%s0 + $0x1080] sm:$0xff]
  %v543 = vld [vmem:[%s0 + $0x1088] sm:$0xff]
  %v544 = vld [vmem:[%s0 + $0x1090] sm:$0xff]
  %v545 = vld [vmem:[%s0 + $0x1098] sm:$0xff]
  %v546 = vld [vmem:[%s0 + $0x10a0] sm:$0xff]
  %v547 = vld [vmem:[%s0 + $0x10a8] sm:$0xff]
  %v548 = vld [vmem:[%s0 + $0x10b0] sm:$0xff]
  %v549 = vld [vmem:[%s0 + $0x10b8] sm:$0xff]
  %v550 = vld [vmem:[%s0 + $0x10c0] sm:$0xff]
  %v551 = vld [vmem:[%s0 + $0x10c8] sm:$0xff]
  %v552 = vld [vmem:[%s0 + $0x10d0] sm:$0xff]
  %v553 = vld [vmem:[%s0 + $0x10d8] sm:$0xff]
  %v554 = vld [vmem:[%s0 + $0x10e0] sm:$0xff]
  %v555 = vld [vmem:[%s0 + $0x10e8] sm:$0xff]
  %v556 = vld [vmem:[%s0 + $0x10f0] sm:$0xff]
  %v557 = vld [vmem:[%s0 + $0x10f8] sm:$0xff]
  %v558 = vld [vmem:[%s0 + $0x1100] sm:$0xff]
  %v559 = vld [vmem:[%s0 + $0x1108] sm:$0xff]
  %v560 = vld [vmem:[%s0 + $0x1110] sm:$0xff]
  %v561 = vld [vmem:[%s0 + $0x1118] sm:$0xff]
  %v562 = vld [vmem:[%s0 + $0x1120] sm:$0xff]
  %v563 = vld [vmem:[%s0 + $0x1128] sm:$0xff]
  %v564 = vld [vmem:[%s0 + $0x1130] sm:$0xff]
  %v565 = vld [vmem:[%s0 + $0x1138] sm:$0xff]
  %v566 = vld [vmem:[%s0 + $0x1140] sm:$0x3]
  %v567 = vld [vmem:[%s1] sm:$0xff]
  %v568 = vld [vmem:[%s1 + $0x8] sm:$0xff]
  %v569 = vld [vmem:[%s1 + $0x10] sm:$0xff]
  %v570 = vld [vmem:[%s1 + $0x18] sm:$0x7]
  %v571 = vld [vmem:[%s2] sm:$0x1]
  %v573 = vlaneseq
  %v574 = vshrl.u32 %v573, 7
  %v575 = vsub.s32 0, %v574
  %v576 = vrot.slane %v571, %v575
  %vm578 = vcmask 220160
  %v580 = vsel %vm578, %v14, 0
  %v583 = vsel %vm578, %v15, 0
  %v586 = vsel %vm578, %v16, 0
  %v589 = vsel %vm578, %v17, 0
  %v592 = vsel %vm578, %v18, 0
  %v595 = vsel %vm578, %v19, 0
  %v598 = vsel %vm578, %v20, 0
  %v601 = vsel %vm578, %v21, 0
  %v604 = vsel %vm578, %v22, 0
  %v607 = vsel %vm578, %v23, 0
  %v610 = vsel %vm578, %v24, 0
  %v613 = vsel %vm578, %v25, 0
  %v616 = vsel %vm578, %v26, 0
  %v619 = vsel %vm578, %v27, 0
  %v622 = vsel %vm578, %v28, 0
  %v625 = vsel %vm578, %v29, 0
  %v628 = vsel %vm578, %v30, 0
  %v631 = vsel %vm578, %v31, 0
  %v634 = vsel %vm578, %v32, 0
  %v637 = vsel %vm578, %v33, 0
  %v640 = vsel %vm578, %v34, 0
  %v643 = vsel %vm578, %v35, 0
  %v646 = vsel %vm578, %v36, 0
  %v649 = vsel %vm578, %v37, 0
  %v652 = vsel %vm578, %v38, 0
  %v655 = vsel %vm578, %v39, 0
  %v658 = vsel %vm578, %v40, 0
  %v661 = vsel %vm578, %v41, 0
  %v664 = vsel %vm578, %v42, 0
  %v667 = vsel %vm578, %v43, 0
  %v670 = vsel %vm578, %v44, 0
  %v673 = vsel %vm578, %v45, 0
  %v676 = vsel %vm578, %v46, 0
  %v679 = vsel %vm578, %v47, 0
  %v682 = vsel %vm578, %v48, 0
  %v685 = vsel %vm578, %v49, 0
  %v688 = vsel %vm578, %v50, 0
  %v691 = vsel %vm578, %v51, 0
  %v694 = vsel %vm578, %v52, 0
  %v697 = vsel %vm578, %v53, 0
  %v700 = vsel %vm578, %v54, 0
  %v703 = vsel %vm578, %v55, 0
  %v706 = vsel %vm578, %v56, 0
  %v709 = vsel %vm578, %v57, 0
  %v712 = vsel %vm578, %v58, 0
  %v715 = vsel %vm578, %v59, 0
  %v718 = vsel %vm578, %v60, 0
  %v721 = vsel %vm578, %v61, 0
  %v724 = vsel %vm578, %v62, 0
  %v727 = vsel %vm578, %v63, 0
  %v730 = vsel %vm578, %v64, 0
  %v733 = vsel %vm578, %v65, 0
  %v736 = vsel %vm578, %v66, 0
  %v739 = vsel %vm578, %v67, 0
  %v742 = vsel %vm578, %v68, 0
  %v745 = vsel %vm578, %v69, 0
  %v748 = vsel %vm578, %v70, 0
  %v751 = vsel %vm578, %v71, 0
  %v754 = vsel %vm578, %v72, 0
  %v757 = vsel %vm578, %v73, 0
  %v760 = vsel %vm578, %v74, 0
  %v763 = vsel %vm578, %v75, 0
  %v766 = vsel %vm578, %v76, 0
  %v769 = vsel %vm578, %v77, 0
  %v772 = vsel %vm578, %v78, 0
  %v775 = vsel %vm578, %v79, 0
  %v778 = vsel %vm578, %v80, 0
  %v781 = vsel %vm578, %v81, 0
  %v784 = vsel %vm578, %v82, 0
  %v787 = vsel %vm578, %v83, 0
  %v790 = vsel %vm578, %v84, 0
  %v793 = vsel %vm578, %v85, 0
  %v796 = vsel %vm578, %v86, 0
  %v799 = vsel %vm578, %v87, 0
  %v802 = vsel %vm578, %v88, 0
  %v805 = vsel %vm578, %v89, 0
  %v808 = vsel %vm578, %v90, 0
  %v811 = vsel %vm578, %v91, 0
  %v814 = vsel %vm578, %v92, 0
  %v817 = vsel %vm578, %v93, 0
  %v820 = vsel %vm578, %v94, 0
  %v823 = vsel %vm578, %v95, 0
  %v826 = vsel %vm578, %v96, 0
  %v829 = vsel %vm578, %v97, 0
  %v832 = vsel %vm578, %v98, 0
  %v835 = vsel %vm578, %v99, 0
  %v838 = vsel %vm578, %v100, 0
  %v841 = vsel %vm578, %v101, 0
  %v844 = vsel %vm578, %v102, 0
  %v847 = vsel %vm578, %v103, 0
  %v850 = vsel %vm578, %v104, 0
  %v853 = vsel %vm578, %v105, 0
  %v856 = vsel %vm578, %v106, 0
  %v859 = vsel %vm578, %v107, 0
  %v862 = vsel %vm578, %v108, 0
  %v865 = vsel %vm578, %v109, 0
  %v868 = vsel %vm578, %v110, 0
  %v871 = vsel %vm578, %v111, 0
  %v874 = vsel %vm578, %v112, 0
  %v877 = vsel %vm578, %v113, 0
  %v880 = vsel %vm578, %v114, 0
  %v883 = vsel %vm578, %v115, 0
  %v886 = vsel %vm578, %v116, 0
  %v889 = vsel %vm578, %v117, 0
  %v892 = vsel %vm578, %v118, 0
  %v895 = vsel %vm578, %v119, 0
  %v898 = vsel %vm578, %v120, 0
  %v901 = vsel %vm578, %v121, 0
  %v904 = vsel %vm578, %v122, 0
  %v907 = vsel %vm578, %v123, 0
  %v910 = vsel %vm578, %v124, 0
  %v913 = vsel %vm578, %v125, 0
  %v916 = vsel %vm578, %v126, 0
  %v919 = vsel %vm578, %v127, 0
  %v922 = vsel %vm578, %v128, 0
  %v925 = vsel %vm578, %v129, 0
  %v928 = vsel %vm578, %v130, 0
  %v931 = vsel %vm578, %v131, 0
  %v934 = vsel %vm578, %v132, 0
  %v937 = vsel %vm578, %v133, 0
  %v940 = vsel %vm578, %v134, 0
  %v943 = vsel %vm578, %v135, 0
  %v946 = vsel %vm578, %v136, 0
  %v949 = vsel %vm578, %v137, 0
  %v952 = vsel %vm578, %v138, 0
  %v955 = vsel %vm578, %v139, 0
  %v958 = vsel %vm578, %v140, 0
  %v961 = vsel %vm578, %v141, 0
  %v964 = vsel %vm578, %v142, 0
  %v967 = vsel %vm578, %v143, 0
  %v970 = vsel %vm578, %v144, 0
  %v973 = vsel %vm578, %v145, 0
  %v976 = vsel %vm578, %v146, 0
  %v979 = vsel %vm578, %v147, 0
  %v982 = vsel %vm578, %v148, 0
  %v985 = vsel %vm578, %v149, 0
  %v988 = vsel %vm578, %v150, 0
  %v991 = vsel %vm578, %v151, 0
  %v994 = vsel %vm578, %v152, 0
  %v997 = vsel %vm578, %v153, 0
  %v1000 = vsel %vm578, %v154, 0
  %v1003 = vsel %vm578, %v155, 0
  %v1006 = vsel %vm578, %v156, 0
  %v1009 = vsel %vm578, %v157, 0
  %v1012 = vsel %vm578, %v158, 0
  %v1015 = vsel %vm578, %v159, 0
  %v1018 = vsel %vm578, %v160, 0
  %v1021 = vsel %vm578, %v161, 0
  %v1024 = vsel %vm578, %v162, 0
  %v1027 = vsel %vm578, %v163, 0
  %v1030 = vsel %vm578, %v164, 0
  %v1033 = vsel %vm578, %v165, 0
  %v1036 = vsel %vm578, %v166, 0
  %v1039 = vsel %vm578, %v167, 0
  %v1042 = vsel %vm578, %v168, 0
  %v1045 = vsel %vm578, %v169, 0
  %v1048 = vsel %vm578, %v170, 0
  %v1051 = vsel %vm578, %v171, 0
  %v1054 = vsel %vm578, %v172, 0
  %v1057 = vsel %vm578, %v173, 0
  %v1060 = vsel %vm578, %v174, 0
  %v1063 = vsel %vm578, %v175, 0
  %v1066 = vsel %vm578, %v176, 0
  %v1069 = vsel %vm578, %v177, 0
  %v1072 = vsel %vm578, %v178, 0
  %v1075 = vsel %vm578, %v179, 0
  %v1078 = vsel %vm578, %v180, 0
  %v1081 = vsel %vm578, %v181, 0
  %v1084 = vsel %vm578, %v182, 0
  %v1087 = vsel %vm578, %v183, 0
  %v1090 = vsel %vm578, %v184, 0
  %v1093 = vsel %vm578, %v185, 0
  %v1096 = vsel %vm578, %v186, 0
  %v1099 = vsel %vm578, %v187, 0
  %v1102 = vsel %vm578, %v188, 0
  %v1105 = vsel %vm578, %v189, 0
  %v1108 = vsel %vm578, %v190, 0
  %v1111 = vsel %vm578, %v191, 0
  %v1114 = vsel %vm578, %v192, 0
  %v1117 = vsel %vm578, %v193, 0
  %v1120 = vsel %vm578, %v194, 0
  %v1123 = vsel %vm578, %v195, 0
  %v1126 = vsel %vm578, %v196, 0
  %v1129 = vsel %vm578, %v197, 0
  %v1132 = vsel %vm578, %v198, 0
  %v1135 = vsel %vm578, %v199, 0
  %v1138 = vsel %vm578, %v200, 0
  %v1141 = vsel %vm578, %v201, 0
  %v1144 = vsel %vm578, %v202, 0
  %v1147 = vsel %vm578, %v203, 0
  %v1150 = vsel %vm578, %v204, 0
  %v1153 = vsel %vm578, %v205, 0
  %v1156 = vsel %vm578, %v206, 0
  %v1159 = vsel %vm578, %v207, 0
  %v1162 = vsel %vm578, %v208, 0
  %v1165 = vsel %vm578, %v209, 0
  %v1168 = vsel %vm578, %v210, 0
  %v1171 = vsel %vm578, %v211, 0
  %v1174 = vsel %vm578, %v212, 0
  %v1177 = vsel %vm578, %v213, 0
  %v1180 = vsel %vm578, %v214, 0
  %v1183 = vsel %vm578, %v215, 0
  %v1186 = vsel %vm578, %v216, 0
  %v1189 = vsel %vm578, %v217, 0
  %v1192 = vsel %vm578, %v218, 0
  %v1195 = vsel %vm578, %v219, 0
  %v1198 = vsel %vm578, %v220, 0
  %v1201 = vsel %vm578, %v221, 0
  %v1204 = vsel %vm578, %v222, 0
  %v1207 = vsel %vm578, %v223, 0
  %v1210 = vsel %vm578, %v224, 0
  %v1213 = vsel %vm578, %v225, 0
  %v1216 = vsel %vm578, %v226, 0
  %v1219 = vsel %vm578, %v227, 0
  %v1222 = vsel %vm578, %v228, 0
  %v1225 = vsel %vm578, %v229, 0
  %v1228 = vsel %vm578, %v230, 0
  %v1231 = vsel %vm578, %v231, 0
  %v1234 = vsel %vm578, %v232, 0
  %v1237 = vsel %vm578, %v233, 0
  %v1240 = vsel %vm578, %v234, 0
  %v1243 = vsel %vm578, %v235, 0
  %v1246 = vsel %vm578, %v236, 0
  %v1249 = vsel %vm578, %v237, 0
  %v1252 = vsel %vm578, %v238, 0
  %v1255 = vsel %vm578, %v239, 0
  %v1258 = vsel %vm578, %v240, 0
  %v1261 = vsel %vm578, %v241, 0
  %v1264 = vsel %vm578, %v242, 0
  %v1267 = vsel %vm578, %v243, 0
  %v1270 = vsel %vm578, %v244, 0
  %v1273 = vsel %vm578, %v245, 0
  %v1276 = vsel %vm578, %v246, 0
  %v1279 = vsel %vm578, %v247, 0
  %v1282 = vsel %vm578, %v248, 0
  %v1285 = vsel %vm578, %v249, 0
  %v1288 = vsel %vm578, %v250, 0
  %v1291 = vsel %vm578, %v251, 0
  %v1294 = vsel %vm578, %v252, 0
  %v1297 = vsel %vm578, %v253, 0
  %v1300 = vsel %vm578, %v254, 0
  %v1303 = vsel %vm578, %v255, 0
  %v1306 = vsel %vm578, %v256, 0
  %v1309 = vsel %vm578, %v257, 0
  %v1312 = vsel %vm578, %v258, 0
  %v1315 = vsel %vm578, %v259, 0
  %v1318 = vsel %vm578, %v260, 0
  %v1321 = vsel %vm578, %v261, 0
  %v1324 = vsel %vm578, %v262, 0
  %v1327 = vsel %vm578, %v263, 0
  %v1330 = vsel %vm578, %v264, 0
  %v1333 = vsel %vm578, %v265, 0
  %v1336 = vsel %vm578, %v266, 0
  %v1339 = vsel %vm578, %v267, 0
  %v1342 = vsel %vm578, %v268, 0
  %v1345 = vsel %vm578, %v269, 0
  %v1348 = vsel %vm578, %v270, 0
  %v1351 = vsel %vm578, %v271, 0
  %v1354 = vsel %vm578, %v272, 0
  %v1357 = vsel %vm578, %v273, 0
  %v1360 = vsel %vm578, %v274, 0
  %v1363 = vsel %vm578, %v275, 0
  %v1366 = vsel %vm578, %v276, 0
  %v1369 = vsel %vm578, %v277, 0
  %v1372 = vsel %vm578, %v278, 0
  %v1375 = vsel %vm578, %v279, 0
  %v1378 = vsel %vm578, %v280, 0
  %v1381 = vsel %vm578, %v281, 0
  %v1384 = vsel %vm578, %v282, 0
  %v1387 = vsel %vm578, %v283, 0
  %v1390 = vsel %vm578, %v284, 0
  %v1393 = vsel %vm578, %v285, 0
  %v1396 = vsel %vm578, %v286, 0
  %v1399 = vsel %vm578, %v287, 0
  %v1402 = vsel %vm578, %v288, 0
  %v1405 = vsel %vm578, %v289, 0
  %v1408 = vsel %vm578, %v290, 0
  %v1411 = vsel %vm578, %v291, 0
  %v1414 = vsel %vm578, %v292, 0
  %v1417 = vsel %vm578, %v293, 0
  %v1420 = vsel %vm578, %v294, 0
  %v1423 = vsel %vm578, %v295, 0
  %v1426 = vsel %vm578, %v296, 0
  %v1429 = vsel %vm578, %v297, 0
  %v1432 = vsel %vm578, %v298, 0
  %v1435 = vsel %vm578, %v299, 0
  %v1438 = vsel %vm578, %v300, 0
  %v1441 = vsel %vm578, %v301, 0
  %v1444 = vsel %vm578, %v302, 0
  %v1447 = vsel %vm578, %v303, 0
  %v1450 = vsel %vm578, %v304, 0
  %v1453 = vsel %vm578, %v305, 0
  %v1456 = vsel %vm578, %v306, 0
  %v1459 = vsel %vm578, %v307, 0
  %v1462 = vsel %vm578, %v308, 0
  %v1465 = vsel %vm578, %v309, 0
  %v1468 = vsel %vm578, %v310, 0
  %v1471 = vsel %vm578, %v311, 0
  %v1474 = vsel %vm578, %v312, 0
  %v1477 = vsel %vm578, %v313, 0
  %v1480 = vsel %vm578, %v314, 0
  %v1483 = vsel %vm578, %v315, 0
  %v1486 = vsel %vm578, %v316, 0
  %v1489 = vsel %vm578, %v317, 0
  %v1492 = vsel %vm578, %v318, 0
  %v1495 = vsel %vm578, %v319, 0
  %v1498 = vsel %vm578, %v320, 0
  %v1501 = vsel %vm578, %v321, 0
  %v1504 = vsel %vm578, %v322, 0
  %v1507 = vsel %vm578, %v323, 0
  %v1510 = vsel %vm578, %v324, 0
  %v1513 = vsel %vm578, %v325, 0
  %v1516 = vsel %vm578, %v326, 0
  %v1519 = vsel %vm578, %v327, 0
  %v1522 = vsel %vm578, %v328, 0
  %v1525 = vsel %vm578, %v329, 0
  %v1528 = vsel %vm578, %v330, 0
  %v1531 = vsel %vm578, %v331, 0
  %v1534 = vsel %vm578, %v332, 0
  %v1537 = vsel %vm578, %v333, 0
  %v1540 = vsel %vm578, %v334, 0
  %v1543 = vsel %vm578, %v335, 0
  %v1546 = vsel %vm578, %v336, 0
  %v1549 = vsel %vm578, %v337, 0
  %v1552 = vsel %vm578, %v338, 0
  %v1555 = vsel %vm578, %v339, 0
  %v1558 = vsel %vm578, %v340, 0
  %v1561 = vsel %vm578, %v341, 0
  %v1564 = vsel %vm578, %v342, 0
  %v1567 = vsel %vm578, %v343, 0
  %v1570 = vsel %vm578, %v344, 0
  %v1573 = vsel %vm578, %v345, 0
  %v1576 = vsel %vm578, %v346, 0
  %v1579 = vsel %vm578, %v347, 0
  %v1582 = vsel %vm578, %v348, 0
  %v1585 = vsel %vm578, %v349, 0
  %v1588 = vsel %vm578, %v350, 0
  %v1591 = vsel %vm578, %v351, 0
  %v1594 = vsel %vm578, %v352, 0
  %v1597 = vsel %vm578, %v353, 0
  %v1600 = vsel %vm578, %v354, 0
  %v1603 = vsel %vm578, %v355, 0
  %v1606 = vsel %vm578, %v356, 0
  %v1609 = vsel %vm578, %v357, 0
  %v1612 = vsel %vm578, %v358, 0
  %v1615 = vsel %vm578, %v359, 0
  %v1618 = vsel %vm578, %v360, 0
  %v1621 = vsel %vm578, %v361, 0
  %v1624 = vsel %vm578, %v362, 0
  %v1627 = vsel %vm578, %v363, 0
  %v1630 = vsel %vm578, %v364, 0
  %v1633 = vsel %vm578, %v365, 0
  %v1636 = vsel %vm578, %v366, 0
  %v1639 = vsel %vm578, %v367, 0
  %v1642 = vsel %vm578, %v368, 0
  %v1645 = vsel %vm578, %v369, 0
  %v1648 = vsel %vm578, %v370, 0
  %v1651 = vsel %vm578, %v371, 0
  %v1654 = vsel %vm578, %v372, 0
  %v1657 = vsel %vm578, %v373, 0
  %v1660 = vsel %vm578, %v374, 0
  %v1663 = vsel %vm578, %v375, 0
  %v1666 = vsel %vm578, %v376, 0
  %v1669 = vsel %vm578, %v377, 0
  %v1672 = vsel %vm578, %v378, 0
  %v1675 = vsel %vm578, %v379, 0
  %v1678 = vsel %vm578, %v380, 0
  %v1681 = vsel %vm578, %v381, 0
  %v1684 = vsel %vm578, %v382, 0
  %v1687 = vsel %vm578, %v383, 0
  %v1690 = vsel %vm578, %v384, 0
  %v1693 = vsel %vm578, %v385, 0
  %v1696 = vsel %vm578, %v386, 0
  %v1699 = vsel %vm578, %v387, 0
  %v1702 = vsel %vm578, %v388, 0
  %v1705 = vsel %vm578, %v389, 0
  %v1708 = vsel %vm578, %v390, 0
  %v1711 = vsel %vm578, %v391, 0
  %v1714 = vsel %vm578, %v392, 0
  %v1717 = vsel %vm578, %v393, 0
  %v1720 = vsel %vm578, %v394, 0
  %v1723 = vsel %vm578, %v395, 0
  %v1726 = vsel %vm578, %v396, 0
  %v1729 = vsel %vm578, %v397, 0
  %v1732 = vsel %vm578, %v398, 0
  %v1735 = vsel %vm578, %v399, 0
  %v1738 = vsel %vm578, %v400, 0
  %v1741 = vsel %vm578, %v401, 0
  %v1744 = vsel %vm578, %v402, 0
  %v1747 = vsel %vm578, %v403, 0
  %v1750 = vsel %vm578, %v404, 0
  %v1753 = vsel %vm578, %v405, 0
  %v1756 = vsel %vm578, %v406, 0
  %v1759 = vsel %vm578, %v407, 0
  %v1762 = vsel %vm578, %v408, 0
  %v1765 = vsel %vm578, %v409, 0
  %v1768 = vsel %vm578, %v410, 0
  %v1771 = vsel %vm578, %v411, 0
  %v1774 = vsel %vm578, %v412, 0
  %v1777 = vsel %vm578, %v413, 0
  %v1780 = vsel %vm578, %v414, 0
  %v1783 = vsel %vm578, %v415, 0
  %v1786 = vsel %vm578, %v416, 0
  %v1789 = vsel %vm578, %v417, 0
  %v1792 = vsel %vm578, %v418, 0
  %v1795 = vsel %vm578, %v419, 0
  %v1798 = vsel %vm578, %v420, 0
  %v1801 = vsel %vm578, %v421, 0
  %v1804 = vsel %vm578, %v422, 0
  %v1807 = vsel %vm578, %v423, 0
  %v1810 = vsel %vm578, %v424, 0
  %v1813 = vsel %vm578, %v425, 0
  %v1816 = vsel %vm578, %v426, 0
  %v1819 = vsel %vm578, %v427, 0
  %v1822 = vsel %vm578, %v428, 0
  %v1825 = vsel %vm578, %v429, 0
  %v1828 = vsel %vm578, %v430, 0
  %v1831 = vsel %vm578, %v431, 0
  %v1834 = vsel %vm578, %v432, 0
  %v1837 = vsel %vm578, %v433, 0
  %v1840 = vsel %vm578, %v434, 0
  %v1843 = vsel %vm578, %v435, 0
  %v1846 = vsel %vm578, %v436, 0
  %v1849 = vsel %vm578, %v437, 0
  %v1852 = vsel %vm578, %v438, 0
  %v1855 = vsel %vm578, %v439, 0
  %v1858 = vsel %vm578, %v440, 0
  %v1861 = vsel %vm578, %v441, 0
  %v1864 = vsel %vm578, %v442, 0
  %v1867 = vsel %vm578, %v443, 0
  %v1870 = vsel %vm578, %v444, 0
  %v1873 = vsel %vm578, %v445, 0
  %v1876 = vsel %vm578, %v446, 0
  %v1879 = vsel %vm578, %v447, 0
  %v1882 = vsel %vm578, %v448, 0
  %v1885 = vsel %vm578, %v449, 0
  %v1888 = vsel %vm578, %v450, 0
  %v1891 = vsel %vm578, %v451, 0
  %v1894 = vsel %vm578, %v452, 0
  %v1897 = vsel %vm578, %v453, 0
  %v1900 = vsel %vm578, %v454, 0
  %v1903 = vsel %vm578, %v455, 0
  %v1906 = vsel %vm578, %v456, 0
  %v1909 = vsel %vm578, %v457, 0
  %v1912 = vsel %vm578, %v458, 0
  %v1915 = vsel %vm578, %v459, 0
  %v1918 = vsel %vm578, %v460, 0
  %v1921 = vsel %vm578, %v461, 0
  %v1924 = vsel %vm578, %v462, 0
  %v1927 = vsel %vm578, %v463, 0
  %v1930 = vsel %vm578, %v464, 0
  %v1933 = vsel %vm578, %v465, 0
  %v1936 = vsel %vm578, %v466, 0
  %v1939 = vsel %vm578, %v467, 0
  %v1942 = vsel %vm578, %v468, 0
  %v1945 = vsel %vm578, %v469, 0
  %v1948 = vsel %vm578, %v470, 0
  %v1951 = vsel %vm578, %v471, 0
  %v1954 = vsel %vm578, %v472, 0
  %v1957 = vsel %vm578, %v473, 0
  %v1960 = vsel %vm578, %v474, 0
  %v1963 = vsel %vm578, %v475, 0
  %v1966 = vsel %vm578, %v476, 0
  %v1969 = vsel %vm578, %v477, 0
  %v1972 = vsel %vm578, %v478, 0
  %v1975 = vsel %vm578, %v479, 0
  %v1978 = vsel %vm578, %v480, 0
  %v1981 = vsel %vm578, %v481, 0
  %v1984 = vsel %vm578, %v482, 0
  %v1987 = vsel %vm578, %v483, 0
  %v1990 = vsel %vm578, %v484, 0
  %v1993 = vsel %vm578, %v485, 0
  %v1996 = vsel %vm578, %v486, 0
  %v1999 = vsel %vm578, %v487, 0
  %v2002 = vsel %vm578, %v488, 0
  %v2005 = vsel %vm578, %v489, 0
  %v2008 = vsel %vm578, %v490, 0
  %v2011 = vsel %vm578, %v491, 0
  %v2014 = vsel %vm578, %v492, 0
  %v2017 = vsel %vm578, %v493, 0
  %v2020 = vsel %vm578, %v494, 0
  %v2023 = vsel %vm578, %v495, 0
  %v2026 = vsel %vm578, %v496, 0
  %v2029 = vsel %vm578, %v497, 0
  %v2032 = vsel %vm578, %v498, 0
  %v2035 = vsel %vm578, %v499, 0
  %v2038 = vsel %vm578, %v500, 0
  %v2041 = vsel %vm578, %v501, 0
  %v2044 = vsel %vm578, %v502, 0
  %v2047 = vsel %vm578, %v503, 0
  %v2050 = vsel %vm578, %v504, 0
  %v2053 = vsel %vm578, %v505, 0
  %v2056 = vsel %vm578, %v506, 0
  %v2059 = vsel %vm578, %v507, 0
  %v2062 = vsel %vm578, %v508, 0
  %v2065 = vsel %vm578, %v509, 0
  %v2068 = vsel %vm578, %v510, 0
  %v2071 = vsel %vm578, %v511, 0
  %v2074 = vsel %vm578, %v512, 0
  %v2077 = vsel %vm578, %v513, 0
  %v2080 = vsel %vm578, %v514, 0
  %v2083 = vsel %vm578, %v515, 0
  %v2086 = vsel %vm578, %v516, 0
  %v2089 = vsel %vm578, %v517, 0
  %v2092 = vsel %vm578, %v518, 0
  %v2095 = vsel %vm578, %v519, 0
  %v2098 = vsel %vm578, %v520, 0
  %v2101 = vsel %vm578, %v521, 0
  %v2104 = vsel %vm578, %v522, 0
  %v2107 = vsel %vm578, %v523, 0
  %v2110 = vsel %vm578, %v524, 0
  %v2113 = vsel %vm578, %v525, 0
  %v2116 = vsel %vm578, %v526, 0
  %v2119 = vsel %vm578, %v527, 0
  %v2122 = vsel %vm578, %v528, 0
  %v2125 = vsel %vm578, %v529, 0
  %v2128 = vsel %vm578, %v530, 0
  %v2131 = vsel %vm578, %v531, 0
  %v2134 = vsel %vm578, %v532, 0
  %v2137 = vsel %vm578, %v533, 0
  %v2140 = vsel %vm578, %v534, 0
  %v2143 = vsel %vm578, %v535, 0
  %v2146 = vsel %vm578, %v536, 0
  %v2149 = vsel %vm578, %v537, 0
  %v2152 = vsel %vm578, %v538, 0
  %v2155 = vsel %vm578, %v539, 0
  %v2158 = vsel %vm578, %v540, 0
  %v2161 = vsel %vm578, %v541, 0
  %v2164 = vsel %vm578, %v542, 0
  %v2167 = vsel %vm578, %v543, 0
  %v2170 = vsel %vm578, %v544, 0
  %v2173 = vsel %vm578, %v545, 0
  %v2176 = vsel %vm578, %v546, 0
  %v2179 = vsel %vm578, %v547, 0
  %v2182 = vsel %vm578, %v548, 0
  %v2185 = vsel %vm578, %v549, 0
  %v2188 = vsel %vm578, %v550, 0
  %v2191 = vsel %vm578, %v551, 0
  %v2194 = vsel %vm578, %v552, 0
  %v2197 = vsel %vm578, %v553, 0
  %v2200 = vsel %vm578, %v554, 0
  %v2203 = vsel %vm578, %v555, 0
  %v2206 = vsel %vm578, %v556, 0
  %v2209 = vsel %vm578, %v557, 0
  %v2212 = vsel %vm578, %v558, 0
  %v2215 = vsel %vm578, %v559, 0
  %v2218 = vsel %vm578, %v560, 0
  %v2221 = vsel %vm578, %v561, 0
  %v2224 = vsel %vm578, %v562, 0
  %v2227 = vsel %vm578, %v563, 0
  %v2230 = vsel %vm578, %v564, 0
  %v2233 = vsel %vm578, %v565, 0
  %v2236 = vsel %vm578, %v566, 0
  %vm2238 = vcmask 1042432
  %v2240 = vsel %vm2238, %v570, 0
  %2242 = vmatprep.subr.mxu0 0.0
  %2243 = vmatpush1.msra.mxu0 %v567
  %2244 = vmatprep.subr.mxu0 0.0
  %2245 = vmatpush1.msra.mxu0 %v568
  %2246 = vmatprep.subr.mxu0 0.0
  %2247 = vmatpush1.msra.mxu0 %v569
  %2248 = vmatprep.subr.mxu0 0.0
  %2249 = vmatpush1.msra.mxu0 %v2240
  %2250 = vmatprep.subr.mxu0 0.0
  %2251 = vmatpush1.msra.mxu0 0.0
  %2252 = vmatprep.subr.mxu0 0.0
  %2253 = vmatpush1.msra.mxu0 0.0
  %2254 = vmatprep.subr.mxu0 0.0
  %2255 = vmatpush1.msra.mxu0 0.0
  %2256 = vmatprep.subr.mxu0 0.0
  %2257 = vmatpush1.msra.mxu0 0.0
  %2258 = vmatprep.subr.mxu0 0.0
  %2259 = vmatpush1.msra.mxu0 0.0
  %2260 = vmatprep.subr.mxu0 0.0
  %2261 = vmatpush1.msra.mxu0 0.0
  %2262 = vmatprep.subr.mxu0 0.0
  %2263 = vmatpush1.msra.mxu0 0.0
  %2264 = vmatprep.subr.mxu0 0.0
  %2265 = vmatpush1.msra.mxu0 0.0
  %2266 = vmatprep.subr.mxu0 0.0
  %2267 = vmatpush1.msra.mxu0 0.0
  %2268 = vmatprep.subr.mxu0 0.0
  %2269 = vmatpush1.msra.mxu0 0.0
  %2270 = vmatprep.subr.mxu0 0.0
  %2271 = vmatpush1.msra.mxu0 0.0
  %2272 = vmatprep.subr.mxu0 0.0
  %2273 = vmatpush1.msra.mxu0 0.0
  %2274 = vmatprep.subr.mxu0 0.0
  %2275 = vmatpush1.msra.mxu0 0.0
  %2276 = vmatprep.subr.mxu0 0.0
  %2277 = vmatpush1.msra.mxu0 0.0
  %2278 = vmatprep.subr.mxu0 0.0
  %2279 = vmatpush1.msra.mxu0 0.0
  %2280 = vmatprep.subr.mxu0 0.0
  %2281 = vmatpush1.msra.mxu0 0.0
  %2282 = vmatprep.subr.mxu0 0.0
  %2283 = vmatpush1.msra.mxu0 0.0
  %2284 = vmatprep.subr.mxu0 0.0
  %2285 = vmatpush1.msra.mxu0 0.0
  %2286 = vmatprep.subr.mxu0 0.0
  %2287 = vmatpush1.msra.mxu0 0.0
  %2288 = vmatprep.subr.mxu0 0.0
  %2289 = vmatpush1.msra.mxu0 0.0
  %2290 = vmatprep.subr.mxu0 0.0
  %2291 = vmatpush1.msra.mxu0 0.0
  %2292 = vmatprep.subr.mxu0 0.0
  %2293 = vmatpush1.msra.mxu0 0.0
  %2294 = vmatprep.subr.mxu0 0.0
  %2295 = vmatpush1.msra.mxu0 0.0
  %2296 = vmatprep.subr.mxu0 0.0
  %2297 = vmatpush1.msra.mxu0 0.0
  %2298 = vmatprep.subr.mxu0 0.0
  %2299 = vmatpush1.msra.mxu0 0.0
  %2300 = vmatprep.subr.mxu0 0.0
  %2301 = vmatpush1.msra.mxu0 0.0
  %2302 = vmatprep.subr.mxu0 0.0
  %2303 = vmatpush1.msra.mxu0 0.0
  %2304 = vmatprep.subr.mxu0 0.0
  %2305 = vmatpush1.msra.mxu0 0.0
  %2306 = vmatprep.mubr.f32.mxu0 0.0
  %2307 = vmatmul.mubr.f32.gmra.mrb[0].mxu0 %v580
  %v2308 = vpop.f32.mrb[0].mxu0
  %v2309 = vadd.f32 %v576, %v2308
  %v2310 = vpop.f32.mrb[0].mxu0
  %2311 = vmatprep.mubr.f32.mxu0 0.0
  %2312 = vmatmul.mubr.f32.gmra.mrb[0].mxu0 %v583
  %v2313 = vpop.f32.mrb[0].mxu0
  %v2314 = vadd.f32 %v576, %v2313
  %v2315 = vpop.f32.mrb[0].mxu0
  %2316 = vmatprep.mubr.f32.mxu0 0.0
  %2317 = vmatmul.mubr.f32.gmra.mrb[0].mxu0 %v586
  %v2318 = vpop.f32.mrb[0].mxu0
  %v2319 = vadd.f32 %v576, %v2318
  %v2320 = vpop.f32.mrb[0].mxu0
  %2321 = vmatprep.mubr.f32.mxu0 0.0
  %2322 = vmatmul.mubr.f32.gmra.mrb[0].mxu0 %v589
  %v2323 = vpop.f32.mrb[0].mxu0
  %v2324 = vadd.f32 %v576, %v2323
  %v2325 = vpop.f32.mrb[0].mxu0
  %2326 = vmatprep.mubr.f32.mxu0 0.0
  %2327 = vmatmul.mubr.f32.gmra.mrb[0].mxu0 %v592
  %v2328 = vpop.f32.mrb[0].mxu0
  %v2329 = vadd.f32 %v576, %v2328
  %v2330 = vpop.f32.mrb[0].mxu0
  %2331 = vmatprep.mubr.f32.mxu0 0.0
  %2332 = vmatmul.mubr.f32.gmra.mrb[0].mxu0 %v595
  %v2333 = vpop.f32.mrb[0].mxu0
  %v2334 = vadd.f32 %v576, %v2333
  %v2335 = vpop.f32.mrb[0].mxu0
  %2336 = vmatprep.mubr.f32.mxu0 0.0
  %2337 = vmatmul.mubr.f32.gmra.mrb[0].mxu0 %v598
  %v2338 = vpop.f32.mrb[0].mxu0
  %v2339 = vadd.f32 %v576, %v2338
  %v2340 = vpop.f32.mrb[0].mxu0
  %2341 = vmatprep.mubr.f32.mxu0 0.0
  %2342 = vmatmul.mubr.f32.gmra.mrb[0].mxu0 %v601
  %v2343 = vpop.f32.mrb[0].mxu0
  %v2344 = vadd.f32 %v576, %v2343
  %v2345 = vpop.f32.mrb[0].mxu0
  %2346 = vmatprep.mubr.f32.mxu0 0.0
  %2347 = vmatmul.mubr.f32.gmra.mrb[0].mxu0 %v604
  %v2348 = vpop.f32.mrb[0].mxu0
  %v2349 = vadd.f32 %v576, %v2348
  %v2350 = vpop.f32.mrb[0].mxu0
  %2351 = vmatprep.mubr.f32.mxu0 0.0
  %2352 = vmatmul.mubr.f32.gmra.mrb[0].mxu0 %v607
  %v2353 = vpop.f32.mrb[0].mxu0
  %v2354 = vadd.f32 %v576, %v2353
  %v2355 = vpop.f32.mrb[0].mxu0
  %2356 = vmatprep.mubr.f32.mxu0 0.0
  %2357 = vmatmul.mubr.f32.gmra.mrb[0].mxu0 %v610
  %v2358 = vpop.f32.mrb[0].mxu0
  %v2359 = vadd.f32 %v576, %v2358
  %v2360 = vpop.f32.mrb[0].mxu0
  %2361 = vmatprep.mubr.f32.mxu0 0.0
  %2362 = vmatmul.mubr.f32.gmra.mrb[0].mxu0 %v613
  %v2363 = vpop.f32.mrb[0].mxu0
  %v2364 = vadd.f32 %v576, %v2363
  %v2365 = vpop.f32.mrb[0].mxu0
  %2366 = vmatprep.mubr.f32.mxu0 0.0
  %2367 = vmatmul.mubr.f32.gmra.mrb[0].mxu0 %v616
  %v2368 = vpop.f32.mrb[0].mxu0
  %v2369 = vadd.f32 %v576, %v2368
  %v2370 = vpop.f32.mrb[0].mxu0
  %2371 = vmatprep.mubr.f32.mxu0 0.0
  %2372 = vmatmul.mubr.f32.gmra.mrb[0].mxu0 %v619
  %v2373 = vpop.f32.mrb[0].mxu0
  %v2374 = vadd.f32 %v576, %v2373
  %v2375 = vpop.f32.mrb[0].mxu0
  %2376 = vmatprep.mubr.f32.mxu0 0.0
  %2377 = vmatmul.mubr.f32.gmra.mrb[0].mxu0 %v622
  %v2378 = vpop.f32.mrb[0].mxu0
  %v2379 = vadd.f32 %v576, %v2378
  %v2380 = vpop.f32.mrb[0].mxu0
  %2381 = vmatprep.mubr.f32.mxu0 0.0
  %2382 = vmatmul.mubr.f32.gmra.mrb[0].mxu0 %v625
  %v2383 = vpop.f32.mrb[0].mxu0
  %v2384 = vadd.f32 %v576, %v2383
  %v2385 = vpop.f32.mrb[0].mxu0
  %2386 = vmatprep.mubr.f32.mxu0 0.0
  %2387 = vmatmul.mubr.f32.gmra.mrb[0].mxu0 %v628
  %v2388 = vpop.f32.mrb[0].mxu0
  %v2389 = vadd.f32 %v576, %v2388
  %v2390 = vpop.f32.mrb[0].mxu0
  %2391 = vmatprep.mubr.f32.mxu0 0.0
  %2392 = vmatmul.mubr.f32.gmra.mrb[0].mxu0 %v631
  %v2393 = vpop.f32.mrb[0].mxu0
  %v2394 = vadd.f32 %v576, %v2393
  %v2395 = vpop.f32.mrb[0].mxu0
  %2396 = vmatprep.mubr.f32.mxu0 0.0
  %2397 = vmatmul.mubr.f32.gmra.mrb[0].mxu0 %v634
  %v2398 = vpop.f32.mrb[0].mxu0
  %v2399 = vadd.f32 %v576, %v2398
  %v2400 = vpop.f32.mrb[0].mxu0
  %2401 = vmatprep.mubr.f32.mxu0 0.0
  %2402 = vmatmul.mubr.f32.gmra.mrb[0].mxu0 %v637
  %v2403 = vpop.f32.mrb[0].mxu0
  %v2404 = vadd.f32 %v576, %v2403
  %v2405 = vpop.f32.mrb[0].mxu0
  %2406 = vmatprep.mubr.f32.mxu0 0.0
  %2407 = vmatmul.mubr.f32.gmra.mrb[0].mxu0 %v640
  %v2408 = vpop.f32.mrb[0].mxu0
  %v2409 = vadd.f32 %v576, %v2408
  %v2410 = vpop.f32.mrb[0].mxu0
  %2411 = vmatprep.mubr.f32.mxu0 0.0
  %2412 = vmatmul.mubr.f32.gmra.mrb[0].mxu0 %v643
  %v2413 = vpop.f32.mrb[0].mxu0
  %v2414 = vadd.f32 %v576, %v2413
  %v2415 = vpop.f32.mrb[0].mxu0
  %2416 = vmatprep.mubr.f32.mxu0 0.0
  %2417 = vmatmul.mubr.f32.gmra.mrb[0].mxu0 %v646
  %v2418 = vpop.f32.mrb[0].mxu0
  %v2419 = vadd.f32 %v576, %v2418
  %v2420 = vpop.f32.mrb[0].mxu0
  %2421 = vmatprep.mubr.f32.mxu0 0.0
  %2422 = vmatmul.mubr.f32.gmra.mrb[0].mxu0 %v649
  %v2423 = vpop.f32.mrb[0].mxu0
  %v2424 = vadd.f32 %v576, %v2423
  %v2425 = vpop.f32.mrb[0].mxu0
  %2426 = vmatprep.mubr.f32.mxu0 0.0
  %2427 = vmatmul.mubr.f32.gmra.mrb[0].mxu0 %v652
  %v2428 = vpop.f32.mrb[0].mxu0
  %v2429 = vadd.f32 %v576, %v2428
  %v2430 = vpop.f32.mrb[0].mxu0
  %2431 = vmatprep.mubr.f32.mxu0 0.0
  %2432 = vmatmul.mubr.f32.gmra.mrb[0].mxu0 %v655
  %v2433 = vpop.f32.mrb[0].mxu0
  %v2434 = vadd.f32 %v576, %v2433
  %v2435 = vpop.f32.mrb[0].mxu0
  %2436 = vmatprep.mubr.f32.mxu0 0.0
  %2437 = vmatmul.mubr.f32.gmra.mrb[0].mxu0 %v658
  %v2438 = vpop.f32.mrb[0].mxu0
  %v2439 = vadd.f32 %v576, %v2438
  %v2440 = vpop.f32.mrb[0].mxu0
  %2441 = vmatprep.mubr.f32.mxu0 0.0
  %2442 = vmatmul.mubr.f32.gmra.mrb[0].mxu0 %v661
  %v2443 = vpop.f32.mrb[0].mxu0
  %v2444 = vadd.f32 %v576, %v2443
  %v2445 = vpop.f32.mrb[0].mxu0
  %2446 = vmatprep.mubr.f32.mxu0 0.0
  %2447 = vmatmul.mubr.f32.gmra.mrb[0].mxu0 %v664
  %v2448 = vpop.f32.mrb[0].mxu0
  %v2449 = vadd.f32 %v576, %v2448
  %v2450 = vpop.f32.mrb[0].mxu0
  %2451 = vmatprep.mubr.f32.mxu0 0.0
  %2452 = vmatmul.mubr.f32.gmra.mrb[0].mxu0 %v667
  %v2453 = vpop.f32.mrb[0].mxu0
  %v2454 = vadd.f32 %v576, %v2453
  %v2455 = vpop.f32.mrb[0].mxu0
  %2456 = vmatprep.mubr.f32.mxu0 0.0
  %2457 = vmatmul.mubr.f32.gmra.mrb[0].mxu0 %v670
  %v2458 = vpop.f32.mrb[0].mxu0
  %v2459 = vadd.f32 %v576, %v2458
  %v2460 = vpop.f32.mrb[0].mxu0
  %2461 = vmatprep.mubr.f32.mxu0 0.0
  %2462 = vmatmul.mubr.f32.gmra.mrb[0].mxu0 %v673
  %v2463 = vpop.f32.mrb[0].mxu0
  %v2464 = vadd.f32 %v576, %v2463
  %v2465 = vpop.f32.mrb[0].mxu0
  %2466 = vmatprep.mubr.f32.mxu0 0.0
  %2467 = vmatmul.mubr.f32.gmra.mrb[0].mxu0 %v676
  %v2468 = vpop.f32.mrb[0].mxu0
  %v2469 = vadd.f32 %v576, %v2468
  %v2470 = vpop.f32.mrb[0].mxu0
  %2471 = vmatprep.mubr.f32.mxu0 0.0
  %2472 = vmatmul.mubr.f32.gmra.mrb[0].mxu0 %v679
  %v2473 = vpop.f32.mrb[0].mxu0
  %v2474 = vadd.f32 %v576, %v2473
  %v2475 = vpop.f32.mrb[0].mxu0
  %2476 = vmatprep.mubr.f32.mxu0 0.0
  %2477 = vmatmul.mubr.f32.gmra.mrb[0].mxu0 %v682
  %v2478 = vpop.f32.mrb[0].mxu0
  %v2479 = vadd.f32 %v576, %v2478
  %v2480 = vpop.f32.mrb[0].mxu0
  %2481 = vmatprep.mubr.f32.mxu0 0.0
  %2482 = vmatmul.mubr.f32.gmra.mrb[0].mxu0 %v685
  %v2483 = vpop.f32.mrb[0].mxu0
  %v2484 = vadd.f32 %v576, %v2483
  %v2485 = vpop.f32.mrb[0].mxu0
  %2486 = vmatprep.mubr.f32.mxu0 0.0
  %2487 = vmatmul.mubr.f32.gmra.mrb[0].mxu0 %v688
  %v2488 = vpop.f32.mrb[0].mxu0
  %v2489 = vadd.f32 %v576, %v2488
  %v2490 = vpop.f32.mrb[0].mxu0
  %2491 = vmatprep.mubr.f32.mxu0 0.0
  %2492 = vmatmul.mubr.f32.gmra.mrb[0].mxu0 %v691
  %v2493 = vpop.f32.mrb[0].mxu0
  %v2494 = vadd.f32 %v576, %v2493
  %v2495 = vpop.f32.mrb[0].mxu0
  %2496 = vmatprep.mubr.f32.mxu0 0.0
  %2497 = vmatmul.mubr.f32.gmra.mrb[0].mxu0 %v694
  %v2498 = vpop.f32.mrb[0].mxu0
  %v2499 = vadd.f32 %v576, %v2498
  %v2500 = vpop.f32.mrb[0].mxu0
  %2501 = vmatprep.mubr.f32.mxu0 0.0
  %2502 = vmatmul.mubr.f32.gmra.mrb[0].mxu0 %v697
  %v2503 = vpop.f32.mrb[0].mxu0
  %v2504 = vadd.f32 %v576, %v2503
  %v2505 = vpop.f32.mrb[0].mxu0
  %2506 = vmatprep.mubr.f32.mxu0 0.0
  %2507 = vmatmul.mubr.f32.gmra.mrb[0].mxu0 %v700
  %v2508 = vpop.f32.mrb[0].mxu0
  %v2509 = vadd.f32 %v576, %v2508
  %v2510 = vpop.f32.mrb[0].mxu0
  %2511 = vmatprep.mubr.f32.mxu0 0.0
  %2512 = vmatmul.mubr.f32.gmra.mrb[0].mxu0 %v703
  %v2513 = vpop.f32.mrb[0].mxu0
  %v2514 = vadd.f32 %v576, %v2513
  %v2515 = vpop.f32.mrb[0].mxu0
  %2516 = vmatprep.mubr.f32.mxu0 0.0
  %2517 = vmatmul.mubr.f32.gmra.mrb[0].mxu0 %v706
  %v2518 = vpop.f32.mrb[0].mxu0
  %v2519 = vadd.f32 %v576, %v2518
  %v2520 = vpop.f32.mrb[0].mxu0
  %2521 = vmatprep.mubr.f32.mxu0 0.0
  %2522 = vmatmul.mubr.f32.gmra.mrb[0].mxu0 %v709
  %v2523 = vpop.f32.mrb[0].mxu0
  %v2524 = vadd.f32 %v576, %v2523
  %v2525 = vpop.f32.mrb[0].mxu0
  %2526 = vmatprep.mubr.f32.mxu0 0.0
  %2527 = vmatmul.mubr.f32.gmra.mrb[0].mxu0 %v712
  %v2528 = vpop.f32.mrb[0].mxu0
  %v2529 = vadd.f32 %v576, %v2528
  %v2530 = vpop.f32.mrb[0].mxu0
  %2531 = vmatprep.mubr.f32.mxu0 0.0
  %2532 = vmatmul.mubr.f32.gmra.mrb[0].mxu0 %v715
  %v2533 = vpop.f32.mrb[0].mxu0
  %v2534 = vadd.f32 %v576, %v2533
  %v2535 = vpop.f32.mrb[0].mxu0
  %2536 = vmatprep.mubr.f32.mxu0 0.0
  %2537 = vmatmul.mubr.f32.gmra.mrb[0].mxu0 %v718
  %v2538 = vpop.f32.mrb[0].mxu0
  %v2539 = vadd.f32 %v576, %v2538
  %v2540 = vpop.f32.mrb[0].mxu0
  %2541 = vmatprep.mubr.f32.mxu0 0.0
  %2542 = vmatmul.mubr.f32.gmra.mrb[0].mxu0 %v721
  %v2543 = vpop.f32.mrb[0].mxu0
  %v2544 = vadd.f32 %v576, %v2543
  %v2545 = vpop.f32.mrb[0].mxu0
  %2546 = vmatprep.mubr.f32.mxu0 0.0
  %2547 = vmatmul.mubr.f32.gmra.mrb[0].mxu0 %v724
  %v2548 = vpop.f32.mrb[0].mxu0
  %v2549 = vadd.f32 %v576, %v2548
  %v2550 = vpop.f32.mrb[0].mxu0
  %2551 = vmatprep.mubr.f32.mxu0 0.0
  %2552 = vmatmul.mubr.f32.gmra.mrb[0].mxu0 %v727
  %v2553 = vpop.f32.mrb[0].mxu0
  %v2554 = vadd.f32 %v576, %v2553
  %v2555 = vpop.f32.mrb[0].mxu0
  %2556 = vmatprep.mubr.f32.mxu0 0.0
  %2557 = vmatmul.mubr.f32.gmra.mrb[0].mxu0 %v730
  %v2558 = vpop.f32.mrb[0].mxu0
  %v2559 = vadd.f32 %v576, %v2558
  %v2560 = vpop.f32.mrb[0].mxu0
  %2561 = vmatprep.mubr.f32.mxu0 0.0
  %2562 = vmatmul.mubr.f32.gmra.mrb[0].mxu0 %v733
  %v2563 = vpop.f32.mrb[0].mxu0
  %v2564 = vadd.f32 %v576, %v2563
  %v2565 = vpop.f32.mrb[0].mxu0
  %2566 = vmatprep.mubr.f32.mxu0 0.0
  %2567 = vmatmul.mubr.f32.gmra.mrb[0].mxu0 %v736
  %v2568 = vpop.f32.mrb[0].mxu0
  %v2569 = vadd.f32 %v576, %v2568
  %v2570 = vpop.f32.mrb[0].mxu0
  %2571 = vmatprep.mubr.f32.mxu0 0.0
  %2572 = vmatmul.mubr.f32.gmra.mrb[0].mxu0 %v739
  %v2573 = vpop.f32.mrb[0].mxu0
  %v2574 = vadd.f32 %v576, %v2573
  %v2575 = vpop.f32.mrb[0].mxu0
  %2576 = vmatprep.mubr.f32.mxu0 0.0
  %2577 = vmatmul.mubr.f32.gmra.mrb[0].mxu0 %v742
  %v2578 = vpop.f32.mrb[0].mxu0
  %v2579 = vadd.f32 %v576, %v2578
  %v2580 = vpop.f32.mrb[0].mxu0
  %2581 = vmatprep.mubr.f32.mxu0 0.0
  %2582 = vmatmul.mubr.f32.gmra.mrb[0].mxu0 %v745
  %v2583 = vpop.f32.mrb[0].mxu0
  %v2584 = vadd.f32 %v576, %v2583
  %v2585 = vpop.f32.mrb[0].mxu0
  %2586 = vmatprep.mubr.f32.mxu0 0.0
  %2587 = vmatmul.mubr.f32.gmra.mrb[0].mxu0 %v748
  %v2588 = vpop.f32.mrb[0].mxu0
  %v2589 = vadd.f32 %v576, %v2588
  %v2590 = vpop.f32.mrb[0].mxu0
  %2591 = vmatprep.mubr.f32.mxu0 0.0
  %2592 = vmatmul.mubr.f32.gmra.mrb[0].mxu0 %v751
  %v2593 = vpop.f32.mrb[0].mxu0
  %v2594 = vadd.f32 %v576, %v2593
  %v2595 = vpop.f32.mrb[0].mxu0
  %2596 = vmatprep.mubr.f32.mxu0 0.0
  %2597 = vmatmul.mubr.f32.gmra.mrb[0].mxu0 %v754
  %v2598 = vpop.f32.mrb[0].mxu0
  %v2599 = vadd.f32 %v576, %v2598
  %v2600 = vpop.f32.mrb[0].mxu0
  %2601 = vmatprep.mubr.f32.mxu0 0.0
  %2602 = vmatmul.mubr.f32.gmra.mrb[0].mxu0 %v757
  %v2603 = vpop.f32.mrb[0].mxu0
  %v2604 = vadd.f32 %v576, %v2603
  %v2605 = vpop.f32.mrb[0].mxu0
  %2606 = vmatprep.mubr.f32.mxu0 0.0
  %2607 = vmatmul.mubr.f32.gmra.mrb[0].mxu0 %v760
  %v2608 = vpop.f32.mrb[0].mxu0
  %v2609 = vadd.f32 %v576, %v2608
  %v2610 = vpop.f32.mrb[0].mxu0
  %2611 = vmatprep.mubr.f32.mxu0 0.0
  %2612 = vmatmul.mubr.f32.gmra.mrb[0].mxu0 %v763
  %v2613 = vpop.f32.mrb[0].mxu0
  %v2614 = vadd.f32 %v576, %v2613
  %v2615 = vpop.f32.mrb[0].mxu0
  %2616 = vmatprep.mubr.f32.mxu0 0.0
  %2617 = vmatmul.mubr.f32.gmra.mrb[0].mxu0 %v766
  %v2618 = vpop.f32.mrb[0].mxu0
  %v2619 = vadd.f32 %v576, %v2618
  %v2620 = vpop.f32.mrb[0].mxu0
  %2621 = vmatprep.mubr.f32.mxu0 0.0
  %2622 = vmatmul.mubr.f32.gmra.mrb[0].mxu0 %v769
  %v2623 = vpop.f32.mrb[0].mxu0
  %v2624 = vadd.f32 %v576, %v2623
  %v2625 = vpop.f32.mrb[0].mxu0
  %2626 = vmatprep.mubr.f32.mxu0 0.0
  %2627 = vmatmul.mubr.f32.gmra.mrb[0].mxu0 %v772
  %v2628 = vpop.f32.mrb[0].mxu0
  %v2629 = vadd.f32 %v576, %v2628
  %v2630 = vpop.f32.mrb[0].mxu0
  %2631 = vmatprep.mubr.f32.mxu0 0.0
  %2632 = vmatmul.mubr.f32.gmra.mrb[0].mxu0 %v775
  %v2633 = vpop.f32.mrb[0].mxu0
  %v2634 = vadd.f32 %v576, %v2633
  %v2635 = vpop.f32.mrb[0].mxu0
  %2636 = vmatprep.mubr.f32.mxu0 0.0
  %2637 = vmatmul.mubr.f32.gmra.mrb[0].mxu0 %v778
  %v2638 = vpop.f32.mrb[0].mxu0
  %v2639 = vadd.f32 %v576, %v2638
  %v2640 = vpop.f32.mrb[0].mxu0
  %2641 = vmatprep.mubr.f32.mxu0 0.0
  %2642 = vmatmul.mubr.f32.gmra.mrb[0].mxu0 %v781
  %v2643 = vpop.f32.mrb[0].mxu0
  %v2644 = vadd.f32 %v576, %v2643
  %v2645 = vpop.f32.mrb[0].mxu0
  %2646 = vmatprep.mubr.f32.mxu0 0.0
  %2647 = vmatmul.mubr.f32.gmra.mrb[0].mxu0 %v784
  %v2648 = vpop.f32.mrb[0].mxu0
  %v2649 = vadd.f32 %v576, %v2648
  %v2650 = vpop.f32.mrb[0].mxu0
  %2651 = vmatprep.mubr.f32.mxu0 0.0
  %2652 = vmatmul.mubr.f32.gmra.mrb[0].mxu0 %v787
  %v2653 = vpop.f32.mrb[0].mxu0
  %v2654 = vadd.f32 %v576, %v2653
  %v2655 = vpop.f32.mrb[0].mxu0
  %2656 = vmatprep.mubr.f32.mxu0 0.0
  %2657 = vmatmul.mubr.f32.gmra.mrb[0].mxu0 %v790
  %v2658 = vpop.f32.mrb[0].mxu0
  %v2659 = vadd.f32 %v576, %v2658
  %v2660 = vpop.f32.mrb[0].mxu0
  %2661 = vmatprep.mubr.f32.mxu0 0.0
  %2662 = vmatmul.mubr.f32.gmra.mrb[0].mxu0 %v793
  %v2663 = vpop.f32.mrb[0].mxu0
  %v2664 = vadd.f32 %v576, %v2663
  %v2665 = vpop.f32.mrb[0].mxu0
  %2666 = vmatprep.mubr.f32.mxu0 0.0
  %2667 = vmatmul.mubr.f32.gmra.mrb[0].mxu0 %v796
  %v2668 = vpop.f32.mrb[0].mxu0
  %v2669 = vadd.f32 %v576, %v2668
  %v2670 = vpop.f32.mrb[0].mxu0
  %2671 = vmatprep.mubr.f32.mxu0 0.0
  %2672 = vmatmul.mubr.f32.gmra.mrb[0].mxu0 %v799
  %v2673 = vpop.f32.mrb[0].mxu0
  %v2674 = vadd.f32 %v576, %v2673
  %v2675 = vpop.f32.mrb[0].mxu0
  %2676 = vmatprep.mubr.f32.mxu0 0.0
  %2677 = vmatmul.mubr.f32.gmra.mrb[0].mxu0 %v802
  %v2678 = vpop.f32.mrb[0].mxu0
  %v2679 = vadd.f32 %v576, %v2678
  %v2680 = vpop.f32.mrb[0].mxu0
  %2681 = vmatprep.mubr.f32.mxu0 0.0
  %2682 = vmatmul.mubr.f32.gmra.mrb[0].mxu0 %v805
  %v2683 = vpop.f32.mrb[0].mxu0
  %v2684 = vadd.f32 %v576, %v2683
  %v2685 = vpop.f32.mrb[0].mxu0
  %2686 = vmatprep.mubr.f32.mxu0 0.0
  %2687 = vmatmul.mubr.f32.gmra.mrb[0].mxu0 %v808
  %v2688 = vpop.f32.mrb[0].mxu0
  %v2689 = vadd.f32 %v576, %v2688
  %v2690 = vpop.f32.mrb[0].mxu0
  %2691 = vmatprep.mubr.f32.mxu0 0.0
  %2692 = vmatmul.mubr.f32.gmra.mrb[0].mxu0 %v811
  %v2693 = vpop.f32.mrb[0].mxu0
  %v2694 = vadd.f32 %v576, %v2693
  %v2695 = vpop.f32.mrb[0].mxu0
  %2696 = vmatprep.mubr.f32.mxu0 0.0
  %2697 = vmatmul.mubr.f32.gmra.mrb[0].mxu0 %v814
  %v2698 = vpop.f32.mrb[0].mxu0
  %v2699 = vadd.f32 %v576, %v2698
  %v2700 = vpop.f32.mrb[0].mxu0
  %2701 = vmatprep.mubr.f32.mxu0 0.0
  %2702 = vmatmul.mubr.f32.gmra.mrb[0].mxu0 %v817
  %v2703 = vpop.f32.mrb[0].mxu0
  %v2704 = vadd.f32 %v576, %v2703
  %v2705 = vpop.f32.mrb[0].mxu0
  %2706 = vmatprep.mubr.f32.mxu0 0.0
  %2707 = vmatmul.mubr.f32.gmra.mrb[0].mxu0 %v820
  %v2708 = vpop.f32.mrb[0].mxu0
  %v2709 = vadd.f32 %v576, %v2708
  %v2710 = vpop.f32.mrb[0].mxu0
  %2711 = vmatprep.mubr.f32.mxu0 0.0
  %2712 = vmatmul.mubr.f32.gmra.mrb[0].mxu0 %v823
  %v2713 = vpop.f32.mrb[0].mxu0
  %v2714 = vadd.f32 %v576, %v2713
  %v2715 = vpop.f32.mrb[0].mxu0
  %2716 = vmatprep.mubr.f32.mxu0 0.0
  %2717 = vmatmul.mubr.f32.gmra.mrb[0].mxu0 %v826
  %v2718 = vpop.f32.mrb[0].mxu0
  %v2719 = vadd.f32 %v576, %v2718
  %v2720 = vpop.f32.mrb[0].mxu0
  %2721 = vmatprep.mubr.f32.mxu0 0.0
  %2722 = vmatmul.mubr.f32.gmra.mrb[0].mxu0 %v829
  %v2723 = vpop.f32.mrb[0].mxu0
  %v2724 = vadd.f32 %v576, %v2723
  %v2725 = vpop.f32.mrb[0].mxu0
  %2726 = vmatprep.mubr.f32.mxu0 0.0
  %2727 = vmatmul.mubr.f32.gmra.mrb[0].mxu0 %v832
  %v2728 = vpop.f32.mrb[0].mxu0
  %v2729 = vadd.f32 %v576, %v2728
  %v2730 = vpop.f32.mrb[0].mxu0
  %2731 = vmatprep.mubr.f32.mxu0 0.0
  %2732 = vmatmul.mubr.f32.gmra.mrb[0].mxu0 %v835
  %v2733 = vpop.f32.mrb[0].mxu0
  %v2734 = vadd.f32 %v576, %v2733
  %v2735 = vpop.f32.mrb[0].mxu0
  %2736 = vmatprep.mubr.f32.mxu0 0.0
  %2737 = vmatmul.mubr.f32.gmra.mrb[0].mxu0 %v838
  %v2738 = vpop.f32.mrb[0].mxu0
  %v2739 = vadd.f32 %v576, %v2738
  %v2740 = vpop.f32.mrb[0].mxu0
  %2741 = vmatprep.mubr.f32.mxu0 0.0
  %2742 = vmatmul.mubr.f32.gmra.mrb[0].mxu0 %v841
  %v2743 = vpop.f32.mrb[0].mxu0
  %v2744 = vadd.f32 %v576, %v2743
  %v2745 = vpop.f32.mrb[0].mxu0
  %2746 = vmatprep.mubr.f32.mxu0 0.0
  %2747 = vmatmul.mubr.f32.gmra.mrb[0].mxu0 %v844
  %v2748 = vpop.f32.mrb[0].mxu0
  %v2749 = vadd.f32 %v576, %v2748
  %v2750 = vpop.f32.mrb[0].mxu0
  %2751 = vmatprep.mubr.f32.mxu0 0.0
  %2752 = vmatmul.mubr.f32.gmra.mrb[0].mxu0 %v847
  %v2753 = vpop.f32.mrb[0].mxu0
  %v2754 = vadd.f32 %v576, %v2753
  %v2755 = vpop.f32.mrb[0].mxu0
  %2756 = vmatprep.mubr.f32.mxu0 0.0
  %2757 = vmatmul.mubr.f32.gmra.mrb[0].mxu0 %v850
  %v2758 = vpop.f32.mrb[0].mxu0
  %v2759 = vadd.f32 %v576, %v2758
  %v2760 = vpop.f32.mrb[0].mxu0
  %2761 = vmatprep.mubr.f32.mxu0 0.0
  %2762 = vmatmul.mubr.f32.gmra.mrb[0].mxu0 %v853
  %v2763 = vpop.f32.mrb[0].mxu0
  %v2764 = vadd.f32 %v576, %v2763
  %v2765 = vpop.f32.mrb[0].mxu0
  %2766 = vmatprep.mubr.f32.mxu0 0.0
  %2767 = vmatmul.mubr.f32.gmra.mrb[0].mxu0 %v856
  %v2768 = vpop.f32.mrb[0].mxu0
  %v2769 = vadd.f32 %v576, %v2768
  %v2770 = vpop.f32.mrb[0].mxu0
  %2771 = vmatprep.mubr.f32.mxu0 0.0
  %2772 = vmatmul.mubr.f32.gmra.mrb[0].mxu0 %v859
  %v2773 = vpop.f32.mrb[0].mxu0
  %v2774 = vadd.f32 %v576, %v2773
  %v2775 = vpop.f32.mrb[0].mxu0
  %2776 = vmatprep.mubr.f32.mxu0 0.0
  %2777 = vmatmul.mubr.f32.gmra.mrb[0].mxu0 %v862
  %v2778 = vpop.f32.mrb[0].mxu0
  %v2779 = vadd.f32 %v576, %v2778
  %v2780 = vpop.f32.mrb[0].mxu0
  %2781 = vmatprep.mubr.f32.mxu0 0.0
  %2782 = vmatmul.mubr.f32.gmra.mrb[0].mxu0 %v865
  %v2783 = vpop.f32.mrb[0].mxu0
  %v2784 = vadd.f32 %v576, %v2783
  %v2785 = vpop.f32.mrb[0].mxu0
  %2786 = vmatprep.mubr.f32.mxu0 0.0
  %2787 = vmatmul.mubr.f32.gmra.mrb[0].mxu0 %v868
  %v2788 = vpop.f32.mrb[0].mxu0
  %v2789 = vadd.f32 %v576, %v2788
  %v2790 = vpop.f32.mrb[0].mxu0
  %2791 = vmatprep.mubr.f32.mxu0 0.0
  %2792 = vmatmul.mubr.f32.gmra.mrb[0].mxu0 %v871
  %v2793 = vpop.f32.mrb[0].mxu0
  %v2794 = vadd.f32 %v576, %v2793
  %v2795 = vpop.f32.mrb[0].mxu0
  %2796 = vmatprep.mubr.f32.mxu0 0.0
  %2797 = vmatmul.mubr.f32.gmra.mrb[0].mxu0 %v874
  %v2798 = vpop.f32.mrb[0].mxu0
  %v2799 = vadd.f32 %v576, %v2798
  %v2800 = vpop.f32.mrb[0].mxu0
  %2801 = vmatprep.mubr.f32.mxu0 0.0
  %2802 = vmatmul.mubr.f32.gmra.mrb[0].mxu0 %v877
  %v2803 = vpop.f32.mrb[0].mxu0
  %v2804 = vadd.f32 %v576, %v2803
  %v2805 = vpop.f32.mrb[0].mxu0
  %2806 = vmatprep.mubr.f32.mxu0 0.0
  %2807 = vmatmul.mubr.f32.gmra.mrb[0].mxu0 %v880
  %v2808 = vpop.f32.mrb[0].mxu0
  %v2809 = vadd.f32 %v576, %v2808
  %v2810 = vpop.f32.mrb[0].mxu0
  %2811 = vmatprep.mubr.f32.mxu0 0.0
  %2812 = vmatmul.mubr.f32.gmra.mrb[0].mxu0 %v883
  %v2813 = vpop.f32.mrb[0].mxu0
  %v2814 = vadd.f32 %v576, %v2813
  %v2815 = vpop.f32.mrb[0].mxu0
  %2816 = vmatprep.mubr.f32.mxu0 0.0
  %2817 = vmatmul.mubr.f32.gmra.mrb[0].mxu0 %v886
  %v2818 = vpop.f32.mrb[0].mxu0
  %v2819 = vadd.f32 %v576, %v2818
  %v2820 = vpop.f32.mrb[0].mxu0
  %2821 = vmatprep.mubr.f32.mxu0 0.0
  %2822 = vmatmul.mubr.f32.gmra.mrb[0].mxu0 %v889
  %v2823 = vpop.f32.mrb[0].mxu0
  %v2824 = vadd.f32 %v576, %v2823
  %v2825 = vpop.f32.mrb[0].mxu0
  %2826 = vmatprep.mubr.f32.mxu0 0.0
  %2827 = vmatmul.mubr.f32.gmra.mrb[0].mxu0 %v892
  %v2828 = vpop.f32.mrb[0].mxu0
  %v2829 = vadd.f32 %v576, %v2828
  %v2830 = vpop.f32.mrb[0].mxu0
  %2831 = vmatprep.mubr.f32.mxu0 0.0
  %2832 = vmatmul.mubr.f32.gmra.mrb[0].mxu0 %v895
  %v2833 = vpop.f32.mrb[0].mxu0
  %v2834 = vadd.f32 %v576, %v2833
  %v2835 = vpop.f32.mrb[0].mxu0
  %2836 = vmatprep.mubr.f32.mxu0 0.0
  %2837 = vmatmul.mubr.f32.gmra.mrb[0].mxu0 %v898
  %v2838 = vpop.f32.mrb[0].mxu0
  %v2839 = vadd.f32 %v576, %v2838
  %v2840 = vpop.f32.mrb[0].mxu0
  %2841 = vmatprep.mubr.f32.mxu0 0.0
  %2842 = vmatmul.mubr.f32.gmra.mrb[0].mxu0 %v901
  %v2843 = vpop.f32.mrb[0].mxu0
  %v2844 = vadd.f32 %v576, %v2843
  %v2845 = vpop.f32.mrb[0].mxu0
  %2846 = vmatprep.mubr.f32.mxu0 0.0
  %2847 = vmatmul.mubr.f32.gmra.mrb[0].mxu0 %v904
  %v2848 = vpop.f32.mrb[0].mxu0
  %v2849 = vadd.f32 %v576, %v2848
  %v2850 = vpop.f32.mrb[0].mxu0
  %2851 = vmatprep.mubr.f32.mxu0 0.0
  %2852 = vmatmul.mubr.f32.gmra.mrb[0].mxu0 %v907
  %v2853 = vpop.f32.mrb[0].mxu0
  %v2854 = vadd.f32 %v576, %v2853
  %v2855 = vpop.f32.mrb[0].mxu0
  %2856 = vmatprep.mubr.f32.mxu0 0.0
  %2857 = vmatmul.mubr.f32.gmra.mrb[0].mxu0 %v910
  %v2858 = vpop.f32.mrb[0].mxu0
  %v2859 = vadd.f32 %v576, %v2858
  %v2860 = vpop.f32.mrb[0].mxu0
  %2861 = vmatprep.mubr.f32.mxu0 0.0
  %2862 = vmatmul.mubr.f32.gmra.mrb[0].mxu0 %v913
  %v2863 = vpop.f32.mrb[0].mxu0
  %v2864 = vadd.f32 %v576, %v2863
  %v2865 = vpop.f32.mrb[0].mxu0
  %2866 = vmatprep.mubr.f32.mxu0 0.0
  %2867 = vmatmul.mubr.f32.gmra.mrb[0].mxu0 %v916
  %v2868 = vpop.f32.mrb[0].mxu0
  %v2869 = vadd.f32 %v576, %v2868
  %v2870 = vpop.f32.mrb[0].mxu0
  %2871 = vmatprep.mubr.f32.mxu0 0.0
  %2872 = vmatmul.mubr.f32.gmra.mrb[0].mxu0 %v919
  %v2873 = vpop.f32.mrb[0].mxu0
  %v2874 = vadd.f32 %v576, %v2873
  %v2875 = vpop.f32.mrb[0].mxu0
  %2876 = vmatprep.mubr.f32.mxu0 0.0
  %2877 = vmatmul.mubr.f32.gmra.mrb[0].mxu0 %v922
  %v2878 = vpop.f32.mrb[0].mxu0
  %v2879 = vadd.f32 %v576, %v2878
  %v2880 = vpop.f32.mrb[0].mxu0
  %2881 = vmatprep.mubr.f32.mxu0 0.0
  %2882 = vmatmul.mubr.f32.gmra.mrb[0].mxu0 %v925
  %v2883 = vpop.f32.mrb[0].mxu0
  %v2884 = vadd.f32 %v576, %v2883
  %v2885 = vpop.f32.mrb[0].mxu0
  %2886 = vmatprep.mubr.f32.mxu0 0.0
  %2887 = vmatmul.mubr.f32.gmra.mrb[0].mxu0 %v928
  %v2888 = vpop.f32.mrb[0].mxu0
  %v2889 = vadd.f32 %v576, %v2888
  %v2890 = vpop.f32.mrb[0].mxu0
  %2891 = vmatprep.mubr.f32.mxu0 0.0
  %2892 = vmatmul.mubr.f32.gmra.mrb[0].mxu0 %v931
  %v2893 = vpop.f32.mrb[0].mxu0
  %v2894 = vadd.f32 %v576, %v2893
  %v2895 = vpop.f32.mrb[0].mxu0
  %2896 = vmatprep.mubr.f32.mxu0 0.0
  %2897 = vmatmul.mubr.f32.gmra.mrb[0].mxu0 %v934
  %v2898 = vpop.f32.mrb[0].mxu0
  %v2899 = vadd.f32 %v576, %v2898
  %v2900 = vpop.f32.mrb[0].mxu0
  %2901 = vmatprep.mubr.f32.mxu0 0.0
  %2902 = vmatmul.mubr.f32.gmra.mrb[0].mxu0 %v937
  %v2903 = vpop.f32.mrb[0].mxu0
  %v2904 = vadd.f32 %v576, %v2903
  %v2905 = vpop.f32.mrb[0].mxu0
  %2906 = vmatprep.mubr.f32.mxu0 0.0
  %2907 = vmatmul.mubr.f32.gmra.mrb[0].mxu0 %v940
  %v2908 = vpop.f32.mrb[0].mxu0
  %v2909 = vadd.f32 %v576, %v2908
  %v2910 = vpop.f32.mrb[0].mxu0
  %2911 = vmatprep.mubr.f32.mxu0 0.0
  %2912 = vmatmul.mubr.f32.gmra.mrb[0].mxu0 %v943
  %v2913 = vpop.f32.mrb[0].mxu0
  %v2914 = vadd.f32 %v576, %v2913
  %v2915 = vpop.f32.mrb[0].mxu0
  %2916 = vmatprep.mubr.f32.mxu0 0.0
  %2917 = vmatmul.mubr.f32.gmra.mrb[0].mxu0 %v946
  %v2918 = vpop.f32.mrb[0].mxu0
  %v2919 = vadd.f32 %v576, %v2918
  %v2920 = vpop.f32.mrb[0].mxu0
  %2921 = vmatprep.mubr.f32.mxu0 0.0
  %2922 = vmatmul.mubr.f32.gmra.mrb[0].mxu0 %v949
  %v2923 = vpop.f32.mrb[0].mxu0
  %v2924 = vadd.f32 %v576, %v2923
  %v2925 = vpop.f32.mrb[0].mxu0
  %2926 = vmatprep.mubr.f32.mxu0 0.0
  %2927 = vmatmul.mubr.f32.gmra.mrb[0].mxu0 %v952
  %v2928 = vpop.f32.mrb[0].mxu0
  %v2929 = vadd.f32 %v576, %v2928
  %v2930 = vpop.f32.mrb[0].mxu0
  %2931 = vmatprep.mubr.f32.mxu0 0.0
  %2932 = vmatmul.mubr.f32.gmra.mrb[0].mxu0 %v955
  %v2933 = vpop.f32.mrb[0].mxu0
  %v2934 = vadd.f32 %v576, %v2933
  %v2935 = vpop.f32.mrb[0].mxu0
  %2936 = vmatprep.mubr.f32.mxu0 0.0
  %2937 = vmatmul.mubr.f32.gmra.mrb[0].mxu0 %v958
  %v2938 = vpop.f32.mrb[0].mxu0
  %v2939 = vadd.f32 %v576, %v2938
  %v2940 = vpop.f32.mrb[0].mxu0
  %2941 = vmatprep.mubr.f32.mxu0 0.0
  %2942 = vmatmul.mubr.f32.gmra.mrb[0].mxu0 %v961
  %v2943 = vpop.f32.mrb[0].mxu0
  %v2944 = vadd.f32 %v576, %v2943
  %v2945 = vpop.f32.mrb[0].mxu0
  %2946 = vmatprep.mubr.f32.mxu0 0.0
  %2947 = vmatmul.mubr.f32.gmra.mrb[0].mxu0 %v964
  %v2948 = vpop.f32.mrb[0].mxu0
  %v2949 = vadd.f32 %v576, %v2948
  %v2950 = vpop.f32.mrb[0].mxu0
  %2951 = vmatprep.mubr.f32.mxu0 0.0
  %2952 = vmatmul.mubr.f32.gmra.mrb[0].mxu0 %v967
  %v2953 = vpop.f32.mrb[0].mxu0
  %v2954 = vadd.f32 %v576, %v2953
  %v2955 = vpop.f32.mrb[0].mxu0
  %2956 = vmatprep.mubr.f32.mxu0 0.0
  %2957 = vmatmul.mubr.f32.gmra.mrb[0].mxu0 %v970
  %v2958 = vpop.f32.mrb[0].mxu0
  %v2959 = vadd.f32 %v576, %v2958
  %v2960 = vpop.f32.mrb[0].mxu0
  %2961 = vmatprep.mubr.f32.mxu0 0.0
  %2962 = vmatmul.mubr.f32.gmra.mrb[0].mxu0 %v973
  %v2963 = vpop.f32.mrb[0].mxu0
  %v2964 = vadd.f32 %v576, %v2963
  %v2965 = vpop.f32.mrb[0].mxu0
  %2966 = vmatprep.mubr.f32.mxu0 0.0
  %2967 = vmatmul.mubr.f32.gmra.mrb[0].mxu0 %v976
  %v2968 = vpop.f32.mrb[0].mxu0
  %v2969 = vadd.f32 %v576, %v2968
  %v2970 = vpop.f32.mrb[0].mxu0
  %2971 = vmatprep.mubr.f32.mxu0 0.0
  %2972 = vmatmul.mubr.f32.gmra.mrb[0].mxu0 %v979
  %v2973 = vpop.f32.mrb[0].mxu0
  %v2974 = vadd.f32 %v576, %v2973
  %v2975 = vpop.f32.mrb[0].mxu0
  %2976 = vmatprep.mubr.f32.mxu0 0.0
  %2977 = vmatmul.mubr.f32.gmra.mrb[0].mxu0 %v982
  %v2978 = vpop.f32.mrb[0].mxu0
  %v2979 = vadd.f32 %v576, %v2978
  %v2980 = vpop.f32.mrb[0].mxu0
  %2981 = vmatprep.mubr.f32.mxu0 0.0
  %2982 = vmatmul.mubr.f32.gmra.mrb[0].mxu0 %v985
  %v2983 = vpop.f32.mrb[0].mxu0
  %v2984 = vadd.f32 %v576, %v2983
  %v2985 = vpop.f32.mrb[0].mxu0
  %2986 = vmatprep.mubr.f32.mxu0 0.0
  %2987 = vmatmul.mubr.f32.gmra.mrb[0].mxu0 %v988
  %v2988 = vpop.f32.mrb[0].mxu0
  %v2989 = vadd.f32 %v576, %v2988
  %v2990 = vpop.f32.mrb[0].mxu0
  %2991 = vmatprep.mubr.f32.mxu0 0.0
  %2992 = vmatmul.mubr.f32.gmra.mrb[0].mxu0 %v991
  %v2993 = vpop.f32.mrb[0].mxu0
  %v2994 = vadd.f32 %v576, %v2993
  %v2995 = vpop.f32.mrb[0].mxu0
  %2996 = vmatprep.mubr.f32.mxu0 0.0
  %2997 = vmatmul.mubr.f32.gmra.mrb[0].mxu0 %v994
  %v2998 = vpop.f32.mrb[0].mxu0
  %v2999 = vadd.f32 %v576, %v2998
  %v3000 = vpop.f32.mrb[0].mxu0
  %3001 = vmatprep.mubr.f32.mxu0 0.0
  %3002 = vmatmul.mubr.f32.gmra.mrb[0].mxu0 %v997
  %v3003 = vpop.f32.mrb[0].mxu0
  %v3004 = vadd.f32 %v576, %v3003
  %v3005 = vpop.f32.mrb[0].mxu0
  %3006 = vmatprep.mubr.f32.mxu0 0.0
  %3007 = vmatmul.mubr.f32.gmra.mrb[0].mxu0 %v1000
  %v3008 = vpop.f32.mrb[0].mxu0
  %v3009 = vadd.f32 %v576, %v3008
  %v3010 = vpop.f32.mrb[0].mxu0
  %3011 = vmatprep.mubr.f32.mxu0 0.0
  %3012 = vmatmul.mubr.f32.gmra.mrb[0].mxu0 %v1003
  %v3013 = vpop.f32.mrb[0].mxu0
  %v3014 = vadd.f32 %v576, %v3013
  %v3015 = vpop.f32.mrb[0].mxu0
  %3016 = vmatprep.mubr.f32.mxu0 0.0
  %3017 = vmatmul.mubr.f32.gmra.mrb[0].mxu0 %v1006
  %v3018 = vpop.f32.mrb[0].mxu0
  %v3019 = vadd.f32 %v576, %v3018
  %v3020 = vpop.f32.mrb[0].mxu0
  %3021 = vmatprep.mubr.f32.mxu0 0.0
  %3022 = vmatmul.mubr.f32.gmra.mrb[0].mxu0 %v1009
  %v3023 = vpop.f32.mrb[0].mxu0
  %v3024 = vadd.f32 %v576, %v3023
  %v3025 = vpop.f32.mrb[0].mxu0
  %3026 = vmatprep.mubr.f32.mxu0 0.0
  %3027 = vmatmul.mubr.f32.gmra.mrb[0].mxu0 %v1012
  %v3028 = vpop.f32.mrb[0].mxu0
  %v3029 = vadd.f32 %v576, %v3028
  %v3030 = vpop.f32.mrb[0].mxu0
  %3031 = vmatprep.mubr.f32.mxu0 0.0
  %3032 = vmatmul.mubr.f32.gmra.mrb[0].mxu0 %v1015
  %v3033 = vpop.f32.mrb[0].mxu0
  %v3034 = vadd.f32 %v576, %v3033
  %v3035 = vpop.f32.mrb[0].mxu0
  %3036 = vmatprep.mubr.f32.mxu0 0.0
  %3037 = vmatmul.mubr.f32.gmra.mrb[0].mxu0 %v1018
  %v3038 = vpop.f32.mrb[0].mxu0
  %v3039 = vadd.f32 %v576, %v3038
  %v3040 = vpop.f32.mrb[0].mxu0
  %3041 = vmatprep.mubr.f32.mxu0 0.0
  %3042 = vmatmul.mubr.f32.gmra.mrb[0].mxu0 %v1021
  %v3043 = vpop.f32.mrb[0].mxu0
  %v3044 = vadd.f32 %v576, %v3043
  %v3045 = vpop.f32.mrb[0].mxu0
  %3046 = vmatprep.mubr.f32.mxu0 0.0
  %3047 = vmatmul.mubr.f32.gmra.mrb[0].mxu0 %v1024
  %v3048 = vpop.f32.mrb[0].mxu0
  %v3049 = vadd.f32 %v576, %v3048
  %v3050 = vpop.f32.mrb[0].mxu0
  %3051 = vmatprep.mubr.f32.mxu0 0.0
  %3052 = vmatmul.mubr.f32.gmra.mrb[0].mxu0 %v1027
  %v3053 = vpop.f32.mrb[0].mxu0
  %v3054 = vadd.f32 %v576, %v3053
  %v3055 = vpop.f32.mrb[0].mxu0
  %3056 = vmatprep.mubr.f32.mxu0 0.0
  %3057 = vmatmul.mubr.f32.gmra.mrb[0].mxu0 %v1030
  %v3058 = vpop.f32.mrb[0].mxu0
  %v3059 = vadd.f32 %v576, %v3058
  %v3060 = vpop.f32.mrb[0].mxu0
  %3061 = vmatprep.mubr.f32.mxu0 0.0
  %3062 = vmatmul.mubr.f32.gmra.mrb[0].mxu0 %v1033
  %v3063 = vpop.f32.mrb[0].mxu0
  %v3064 = vadd.f32 %v576, %v3063
  %v3065 = vpop.f32.mrb[0].mxu0
  %3066 = vmatprep.mubr.f32.mxu0 0.0
  %3067 = vmatmul.mubr.f32.gmra.mrb[0].mxu0 %v1036
  %v3068 = vpop.f32.mrb[0].mxu0
  %v3069 = vadd.f32 %v576, %v3068
  %v3070 = vpop.f32.mrb[0].mxu0
  %3071 = vmatprep.mubr.f32.mxu0 0.0
  %3072 = vmatmul.mubr.f32.gmra.mrb[0].mxu0 %v1039
  %v3073 = vpop.f32.mrb[0].mxu0
  %v3074 = vadd.f32 %v576, %v3073
  %v3075 = vpop.f32.mrb[0].mxu0
  %3076 = vmatprep.mubr.f32.mxu0 0.0
  %3077 = vmatmul.mubr.f32.gmra.mrb[0].mxu0 %v1042
  %v3078 = vpop.f32.mrb[0].mxu0
  %v3079 = vadd.f32 %v576, %v3078
  %v3080 = vpop.f32.mrb[0].mxu0
  %3081 = vmatprep.mubr.f32.mxu0 0.0
  %3082 = vmatmul.mubr.f32.gmra.mrb[0].mxu0 %v1045
  %v3083 = vpop.f32.mrb[0].mxu0
  %v3084 = vadd.f32 %v576, %v3083
  %v3085 = vpop.f32.mrb[0].mxu0
  %3086 = vmatprep.mubr.f32.mxu0 0.0
  %3087 = vmatmul.mubr.f32.gmra.mrb[0].mxu0 %v1048
  %v3088 = vpop.f32.mrb[0].mxu0
  %v3089 = vadd.f32 %v576, %v3088
  %v3090 = vpop.f32.mrb[0].mxu0
  %3091 = vmatprep.mubr.f32.mxu0 0.0
  %3092 = vmatmul.mubr.f32.gmra.mrb[0].mxu0 %v1051
  %v3093 = vpop.f32.mrb[0].mxu0
  %v3094 = vadd.f32 %v576, %v3093
  %v3095 = vpop.f32.mrb[0].mxu0
  %3096 = vmatprep.mubr.f32.mxu0 0.0
  %3097 = vmatmul.mubr.f32.gmra.mrb[0].mxu0 %v1054
  %v3098 = vpop.f32.mrb[0].mxu0
  %v3099 = vadd.f32 %v576, %v3098
  %v3100 = vpop.f32.mrb[0].mxu0
  %3101 = vmatprep.mubr.f32.mxu0 0.0
  %3102 = vmatmul.mubr.f32.gmra.mrb[0].mxu0 %v1057
  %v3103 = vpop.f32.mrb[0].mxu0
  %v3104 = vadd.f32 %v576, %v3103
  %v3105 = vpop.f32.mrb[0].mxu0
  %3106 = vmatprep.mubr.f32.mxu0 0.0
  %3107 = vmatmul.mubr.f32.gmra.mrb[0].mxu0 %v1060
  %v3108 = vpop.f32.mrb[0].mxu0
  %v3109 = vadd.f32 %v576, %v3108
  %v3110 = vpop.f32.mrb[0].mxu0
  %3111 = vmatprep.mubr.f32.mxu0 0.0
  %3112 = vmatmul.mubr.f32.gmra.mrb[0].mxu0 %v1063
  %v3113 = vpop.f32.mrb[0].mxu0
  %v3114 = vadd.f32 %v576, %v3113
  %v3115 = vpop.f32.mrb[0].mxu0
  %3116 = vmatprep.mubr.f32.mxu0 0.0
  %3117 = vmatmul.mubr.f32.gmra.mrb[0].mxu0 %v1066
  %v3118 = vpop.f32.mrb[0].mxu0
  %v3119 = vadd.f32 %v576, %v3118
  %v3120 = vpop.f32.mrb[0].mxu0
  %3121 = vmatprep.mubr.f32.mxu0 0.0
  %3122 = vmatmul.mubr.f32.gmra.mrb[0].mxu0 %v1069
  %v3123 = vpop.f32.mrb[0].mxu0
  %v3124 = vadd.f32 %v576, %v3123
  %v3125 = vpop.f32.mrb[0].mxu0
  %3126 = vmatprep.mubr.f32.mxu0 0.0
  %3127 = vmatmul.mubr.f32.gmra.mrb[0].mxu0 %v1072
  %v3128 = vpop.f32.mrb[0].mxu0
  %v3129 = vadd.f32 %v576, %v3128
  %v3130 = vpop.f32.mrb[0].mxu0
  %3131 = vmatprep.mubr.f32.mxu0 0.0
  %3132 = vmatmul.mubr.f32.gmra.mrb[0].mxu0 %v1075
  %v3133 = vpop.f32.mrb[0].mxu0
  %v3134 = vadd.f32 %v576, %v3133
  %v3135 = vpop.f32.mrb[0].mxu0
  %3136 = vmatprep.mubr.f32.mxu0 0.0
  %3137 = vmatmul.mubr.f32.gmra.mrb[0].mxu0 %v1078
  %v3138 = vpop.f32.mrb[0].mxu0
  %v3139 = vadd.f32 %v576, %v3138
  %v3140 = vpop.f32.mrb[0].mxu0
  %3141 = vmatprep.mubr.f32.mxu0 0.0
  %3142 = vmatmul.mubr.f32.gmra.mrb[0].mxu0 %v1081
  %v3143 = vpop.f32.mrb[0].mxu0
  %v3144 = vadd.f32 %v576, %v3143
  %v3145 = vpop.f32.mrb[0].mxu0
  %3146 = vmatprep.mubr.f32.mxu0 0.0
  %3147 = vmatmul.mubr.f32.gmra.mrb[0].mxu0 %v1084
  %v3148 = vpop.f32.mrb[0].mxu0
  %v3149 = vadd.f32 %v576, %v3148
  %v3150 = vpop.f32.mrb[0].mxu0
  %3151 = vmatprep.mubr.f32.mxu0 0.0
  %3152 = vmatmul.mubr.f32.gmra.mrb[0].mxu0 %v1087
  %v3153 = vpop.f32.mrb[0].mxu0
  %v3154 = vadd.f32 %v576, %v3153
  %v3155 = vpop.f32.mrb[0].mxu0
  %3156 = vmatprep.mubr.f32.mxu0 0.0
  %3157 = vmatmul.mubr.f32.gmra.mrb[0].mxu0 %v1090
  %v3158 = vpop.f32.mrb[0].mxu0
  %v3159 = vadd.f32 %v576, %v3158
  %v3160 = vpop.f32.mrb[0].mxu0
  %3161 = vmatprep.mubr.f32.mxu0 0.0
  %3162 = vmatmul.mubr.f32.gmra.mrb[0].mxu0 %v1093
  %v3163 = vpop.f32.mrb[0].mxu0
  %v3164 = vadd.f32 %v576, %v3163
  %v3165 = vpop.f32.mrb[0].mxu0
  %3166 = vmatprep.mubr.f32.mxu0 0.0
  %3167 = vmatmul.mubr.f32.gmra.mrb[0].mxu0 %v1096
  %v3168 = vpop.f32.mrb[0].mxu0
  %v3169 = vadd.f32 %v576, %v3168
  %v3170 = vpop.f32.mrb[0].mxu0
  %3171 = vmatprep.mubr.f32.mxu0 0.0
  %3172 = vmatmul.mubr.f32.gmra.mrb[0].mxu0 %v1099
  %v3173 = vpop.f32.mrb[0].mxu0
  %v3174 = vadd.f32 %v576, %v3173
  %v3175 = vpop.f32.mrb[0].mxu0
  %3176 = vmatprep.mubr.f32.mxu0 0.0
  %3177 = vmatmul.mubr.f32.gmra.mrb[0].mxu0 %v1102
  %v3178 = vpop.f32.mrb[0].mxu0
  %v3179 = vadd.f32 %v576, %v3178
  %v3180 = vpop.f32.mrb[0].mxu0
  %3181 = vmatprep.mubr.f32.mxu0 0.0
  %3182 = vmatmul.mubr.f32.gmra.mrb[0].mxu0 %v1105
  %v3183 = vpop.f32.mrb[0].mxu0
  %v3184 = vadd.f32 %v576, %v3183
  %v3185 = vpop.f32.mrb[0].mxu0
  %3186 = vmatprep.mubr.f32.mxu0 0.0
  %3187 = vmatmul.mubr.f32.gmra.mrb[0].mxu0 %v1108
  %v3188 = vpop.f32.mrb[0].mxu0
  %v3189 = vadd.f32 %v576, %v3188
  %v3190 = vpop.f32.mrb[0].mxu0
  %3191 = vmatprep.mubr.f32.mxu0 0.0
  %3192 = vmatmul.mubr.f32.gmra.mrb[0].mxu0 %v1111
  %v3193 = vpop.f32.mrb[0].mxu0
  %v3194 = vadd.f32 %v576, %v3193
  %v3195 = vpop.f32.mrb[0].mxu0
  %3196 = vmatprep.mubr.f32.mxu0 0.0
  %3197 = vmatmul.mubr.f32.gmra.mrb[0].mxu0 %v1114
  %v3198 = vpop.f32.mrb[0].mxu0
  %v3199 = vadd.f32 %v576, %v3198
  %v3200 = vpop.f32.mrb[0].mxu0
  %3201 = vmatprep.mubr.f32.mxu0 0.0
  %3202 = vmatmul.mubr.f32.gmra.mrb[0].mxu0 %v1117
  %v3203 = vpop.f32.mrb[0].mxu0
  %v3204 = vadd.f32 %v576, %v3203
  %v3205 = vpop.f32.mrb[0].mxu0
  %3206 = vmatprep.mubr.f32.mxu0 0.0
  %3207 = vmatmul.mubr.f32.gmra.mrb[0].mxu0 %v1120
  %v3208 = vpop.f32.mrb[0].mxu0
  %v3209 = vadd.f32 %v576, %v3208
  %v3210 = vpop.f32.mrb[0].mxu0
  %3211 = vmatprep.mubr.f32.mxu0 0.0
  %3212 = vmatmul.mubr.f32.gmra.mrb[0].mxu0 %v1123
  %v3213 = vpop.f32.mrb[0].mxu0
  %v3214 = vadd.f32 %v576, %v3213
  %v3215 = vpop.f32.mrb[0].mxu0
  %3216 = vmatprep.mubr.f32.mxu0 0.0
  %3217 = vmatmul.mubr.f32.gmra.mrb[0].mxu0 %v1126
  %v3218 = vpop.f32.mrb[0].mxu0
  %v3219 = vadd.f32 %v576, %v3218
  %v3220 = vpop.f32.mrb[0].mxu0
  %3221 = vmatprep.mubr.f32.mxu0 0.0
  %3222 = vmatmul.mubr.f32.gmra.mrb[0].mxu0 %v1129
  %v3223 = vpop.f32.mrb[0].mxu0
  %v3224 = vadd.f32 %v576, %v3223
  %v3225 = vpop.f32.mrb[0].mxu0
  %3226 = vmatprep.mubr.f32.mxu0 0.0
  %3227 = vmatmul.mubr.f32.gmra.mrb[0].mxu0 %v1132
  %v3228 = vpop.f32.mrb[0].mxu0
  %v3229 = vadd.f32 %v576, %v3228
  %v3230 = vpop.f32.mrb[0].mxu0
  %3231 = vmatprep.mubr.f32.mxu0 0.0
  %3232 = vmatmul.mubr.f32.gmra.mrb[0].mxu0 %v1135
  %v3233 = vpop.f32.mrb[0].mxu0
  %v3234 = vadd.f32 %v576, %v3233
  %v3235 = vpop.f32.mrb[0].mxu0
  %3236 = vmatprep.mubr.f32.mxu0 0.0
  %3237 = vmatmul.mubr.f32.gmra.mrb[0].mxu0 %v1138
  %v3238 = vpop.f32.mrb[0].mxu0
  %v3239 = vadd.f32 %v576, %v3238
  %v3240 = vpop.f32.mrb[0].mxu0
  %3241 = vmatprep.mubr.f32.mxu0 0.0
  %3242 = vmatmul.mubr.f32.gmra.mrb[0].mxu0 %v1141
  %v3243 = vpop.f32.mrb[0].mxu0
  %v3244 = vadd.f32 %v576, %v3243
  %v3245 = vpop.f32.mrb[0].mxu0
  %3246 = vmatprep.mubr.f32.mxu0 0.0
  %3247 = vmatmul.mubr.f32.gmra.mrb[0].mxu0 %v1144
  %v3248 = vpop.f32.mrb[0].mxu0
  %v3249 = vadd.f32 %v576, %v3248
  %v3250 = vpop.f32.mrb[0].mxu0
  %3251 = vmatprep.mubr.f32.mxu0 0.0
  %3252 = vmatmul.mubr.f32.gmra.mrb[0].mxu0 %v1147
  %v3253 = vpop.f32.mrb[0].mxu0
  %v3254 = vadd.f32 %v576, %v3253
  %v3255 = vpop.f32.mrb[0].mxu0
  %3256 = vmatprep.mubr.f32.mxu0 0.0
  %3257 = vmatmul.mubr.f32.gmra.mrb[0].mxu0 %v1150
  %v3258 = vpop.f32.mrb[0].mxu0
  %v3259 = vadd.f32 %v576, %v3258
  %v3260 = vpop.f32.mrb[0].mxu0
  %3261 = vmatprep.mubr.f32.mxu0 0.0
  %3262 = vmatmul.mubr.f32.gmra.mrb[0].mxu0 %v1153
  %v3263 = vpop.f32.mrb[0].mxu0
  %v3264 = vadd.f32 %v576, %v3263
  %v3265 = vpop.f32.mrb[0].mxu0
  %3266 = vmatprep.mubr.f32.mxu0 0.0
  %3267 = vmatmul.mubr.f32.gmra.mrb[0].mxu0 %v1156
  %v3268 = vpop.f32.mrb[0].mxu0
  %v3269 = vadd.f32 %v576, %v3268
  %v3270 = vpop.f32.mrb[0].mxu0
  %3271 = vmatprep.mubr.f32.mxu0 0.0
  %3272 = vmatmul.mubr.f32.gmra.mrb[0].mxu0 %v1159
  %v3273 = vpop.f32.mrb[0].mxu0
  %v3274 = vadd.f32 %v576, %v3273
  %v3275 = vpop.f32.mrb[0].mxu0
  %3276 = vmatprep.mubr.f32.mxu0 0.0
  %3277 = vmatmul.mubr.f32.gmra.mrb[0].mxu0 %v1162
  %v3278 = vpop.f32.mrb[0].mxu0
  %v3279 = vadd.f32 %v576, %v3278
  %v3280 = vpop.f32.mrb[0].mxu0
  %3281 = vmatprep.mubr.f32.mxu0 0.0
  %3282 = vmatmul.mubr.f32.gmra.mrb[0].mxu0 %v1165
  %v3283 = vpop.f32.mrb[0].mxu0
  %v3284 = vadd.f32 %v576, %v3283
  %v3285 = vpop.f32.mrb[0].mxu0
  %3286 = vmatprep.mubr.f32.mxu0 0.0
  %3287 = vmatmul.mubr.f32.gmra.mrb[0].mxu0 %v1168
  %v3288 = vpop.f32.mrb[0].mxu0
  %v3289 = vadd.f32 %v576, %v3288
  %v3290 = vpop.f32.mrb[0].mxu0
  %3291 = vmatprep.mubr.f32.mxu0 0.0
  %3292 = vmatmul.mubr.f32.gmra.mrb[0].mxu0 %v1171
  %v3293 = vpop.f32.mrb[0].mxu0
  %v3294 = vadd.f32 %v576, %v3293
  %v3295 = vpop.f32.mrb[0].mxu0
  %3296 = vmatprep.mubr.f32.mxu0 0.0
  %3297 = vmatmul.mubr.f32.gmra.mrb[0].mxu0 %v1174
  %v3298 = vpop.f32.mrb[0].mxu0
  %v3299 = vadd.f32 %v576, %v3298
  %v3300 = vpop.f32.mrb[0].mxu0
  %3301 = vmatprep.mubr.f32.mxu0 0.0
  %3302 = vmatmul.mubr.f32.gmra.mrb[0].mxu0 %v1177
  %v3303 = vpop.f32.mrb[0].mxu0
  %v3304 = vadd.f32 %v576, %v3303
  %v3305 = vpop.f32.mrb[0].mxu0
  %3306 = vmatprep.mubr.f32.mxu0 0.0
  %3307 = vmatmul.mubr.f32.gmra.mrb[0].mxu0 %v1180
  %v3308 = vpop.f32.mrb[0].mxu0
  %v3309 = vadd.f32 %v576, %v3308
  %v3310 = vpop.f32.mrb[0].mxu0
  %3311 = vmatprep.mubr.f32.mxu0 0.0
  %3312 = vmatmul.mubr.f32.gmra.mrb[0].mxu0 %v1183
  %v3313 = vpop.f32.mrb[0].mxu0
  %v3314 = vadd.f32 %v576, %v3313
  %v3315 = vpop.f32.mrb[0].mxu0
  %3316 = vmatprep.mubr.f32.mxu0 0.0
  %3317 = vmatmul.mubr.f32.gmra.mrb[0].mxu0 %v1186
  %v3318 = vpop.f32.mrb[0].mxu0
  %v3319 = vadd.f32 %v576, %v3318
  %v3320 = vpop.f32.mrb[0].mxu0
  %3321 = vmatprep.mubr.f32.mxu0 0.0
  %3322 = vmatmul.mubr.f32.gmra.mrb[0].mxu0 %v1189
  %v3323 = vpop.f32.mrb[0].mxu0
  %v3324 = vadd.f32 %v576, %v3323
  %v3325 = vpop.f32.mrb[0].mxu0
  %3326 = vmatprep.mubr.f32.mxu0 0.0
  %3327 = vmatmul.mubr.f32.gmra.mrb[0].mxu0 %v1192
  %v3328 = vpop.f32.mrb[0].mxu0
  %v3329 = vadd.f32 %v576, %v3328
  %v3330 = vpop.f32.mrb[0].mxu0
  %3331 = vmatprep.mubr.f32.mxu0 0.0
  %3332 = vmatmul.mubr.f32.gmra.mrb[0].mxu0 %v1195
  %v3333 = vpop.f32.mrb[0].mxu0
  %v3334 = vadd.f32 %v576, %v3333
  %v3335 = vpop.f32.mrb[0].mxu0
  %3336 = vmatprep.mubr.f32.mxu0 0.0
  %3337 = vmatmul.mubr.f32.gmra.mrb[0].mxu0 %v1198
  %v3338 = vpop.f32.mrb[0].mxu0
  %v3339 = vadd.f32 %v576, %v3338
  %v3340 = vpop.f32.mrb[0].mxu0
  %3341 = vmatprep.mubr.f32.mxu0 0.0
  %3342 = vmatmul.mubr.f32.gmra.mrb[0].mxu0 %v1201
  %v3343 = vpop.f32.mrb[0].mxu0
  %v3344 = vadd.f32 %v576, %v3343
  %v3345 = vpop.f32.mrb[0].mxu0
  %3346 = vmatprep.mubr.f32.mxu0 0.0
  %3347 = vmatmul.mubr.f32.gmra.mrb[0].mxu0 %v1204
  %v3348 = vpop.f32.mrb[0].mxu0
  %v3349 = vadd.f32 %v576, %v3348
  %v3350 = vpop.f32.mrb[0].mxu0
  %3351 = vmatprep.mubr.f32.mxu0 0.0
  %3352 = vmatmul.mubr.f32.gmra.mrb[0].mxu0 %v1207
  %v3353 = vpop.f32.mrb[0].mxu0
  %v3354 = vadd.f32 %v576, %v3353
  %v3355 = vpop.f32.mrb[0].mxu0
  %3356 = vmatprep.mubr.f32.mxu0 0.0
  %3357 = vmatmul.mubr.f32.gmra.mrb[0].mxu0 %v1210
  %v3358 = vpop.f32.mrb[0].mxu0
  %v3359 = vadd.f32 %v576, %v3358
  %v3360 = vpop.f32.mrb[0].mxu0
  %3361 = vmatprep.mubr.f32.mxu0 0.0
  %3362 = vmatmul.mubr.f32.gmra.mrb[0].mxu0 %v1213
  %v3363 = vpop.f32.mrb[0].mxu0
  %v3364 = vadd.f32 %v576, %v3363
  %v3365 = vpop.f32.mrb[0].mxu0
  %3366 = vmatprep.mubr.f32.mxu0 0.0
  %3367 = vmatmul.mubr.f32.gmra.mrb[0].mxu0 %v1216
  %v3368 = vpop.f32.mrb[0].mxu0
  %v3369 = vadd.f32 %v576, %v3368
  %v3370 = vpop.f32.mrb[0].mxu0
  %3371 = vmatprep.mubr.f32.mxu0 0.0
  %3372 = vmatmul.mubr.f32.gmra.mrb[0].mxu0 %v1219
  %v3373 = vpop.f32.mrb[0].mxu0
  %v3374 = vadd.f32 %v576, %v3373
  %v3375 = vpop.f32.mrb[0].mxu0
  %3376 = vmatprep.mubr.f32.mxu0 0.0
  %3377 = vmatmul.mubr.f32.gmra.mrb[0].mxu0 %v1222
  %v3378 = vpop.f32.mrb[0].mxu0
  %v3379 = vadd.f32 %v576, %v3378
  %v3380 = vpop.f32.mrb[0].mxu0
  %3381 = vmatprep.mubr.f32.mxu0 0.0
  %3382 = vmatmul.mubr.f32.gmra.mrb[0].mxu0 %v1225
  %v3383 = vpop.f32.mrb[0].mxu0
  %v3384 = vadd.f32 %v576, %v3383
  %v3385 = vpop.f32.mrb[0].mxu0
  %3386 = vmatprep.mubr.f32.mxu0 0.0
  %3387 = vmatmul.mubr.f32.gmra.mrb[0].mxu0 %v1228
  %v3388 = vpop.f32.mrb[0].mxu0
  %v3389 = vadd.f32 %v576, %v3388
  %v3390 = vpop.f32.mrb[0].mxu0
  %3391 = vmatprep.mubr.f32.mxu0 0.0
  %3392 = vmatmul.mubr.f32.gmra.mrb[0].mxu0 %v1231
  %v3393 = vpop.f32.mrb[0].mxu0
  %v3394 = vadd.f32 %v576, %v3393
  %v3395 = vpop.f32.mrb[0].mxu0
  %3396 = vmatprep.mubr.f32.mxu0 0.0
  %3397 = vmatmul.mubr.f32.gmra.mrb[0].mxu0 %v1234
  %v3398 = vpop.f32.mrb[0].mxu0
  %v3399 = vadd.f32 %v576, %v3398
  %v3400 = vpop.f32.mrb[0].mxu0
  %3401 = vmatprep.mubr.f32.mxu0 0.0
  %3402 = vmatmul.mubr.f32.gmra.mrb[0].mxu0 %v1237
  %v3403 = vpop.f32.mrb[0].mxu0
  %v3404 = vadd.f32 %v576, %v3403
  %v3405 = vpop.f32.mrb[0].mxu0
  %3406 = vmatprep.mubr.f32.mxu0 0.0
  %3407 = vmatmul.mubr.f32.gmra.mrb[0].mxu0 %v1240
  %v3408 = vpop.f32.mrb[0].mxu0
  %v3409 = vadd.f32 %v576, %v3408
  %v3410 = vpop.f32.mrb[0].mxu0
  %3411 = vmatprep.mubr.f32.mxu0 0.0
  %3412 = vmatmul.mubr.f32.gmra.mrb[0].mxu0 %v1243
  %v3413 = vpop.f32.mrb[0].mxu0
  %v3414 = vadd.f32 %v576, %v3413
  %v3415 = vpop.f32.mrb[0].mxu0
  %3416 = vmatprep.mubr.f32.mxu0 0.0
  %3417 = vmatmul.mubr.f32.gmra.mrb[0].mxu0 %v1246
  %v3418 = vpop.f32.mrb[0].mxu0
  %v3419 = vadd.f32 %v576, %v3418
  %v3420 = vpop.f32.mrb[0].mxu0
  %3421 = vmatprep.mubr.f32.mxu0 0.0
  %3422 = vmatmul.mubr.f32.gmra.mrb[0].mxu0 %v1249
  %v3423 = vpop.f32.mrb[0].mxu0
  %v3424 = vadd.f32 %v576, %v3423
  %v3425 = vpop.f32.mrb[0].mxu0
  %3426 = vmatprep.mubr.f32.mxu0 0.0
  %3427 = vmatmul.mubr.f32.gmra.mrb[0].mxu0 %v1252
  %v3428 = vpop.f32.mrb[0].mxu0
  %v3429 = vadd.f32 %v576, %v3428
  %v3430 = vpop.f32.mrb[0].mxu0
  %3431 = vmatprep.mubr.f32.mxu0 0.0
  %3432 = vmatmul.mubr.f32.gmra.mrb[0].mxu0 %v1255
  %v3433 = vpop.f32.mrb[0].mxu0
  %v3434 = vadd.f32 %v576, %v3433
  %v3435 = vpop.f32.mrb[0].mxu0
  %3436 = vmatprep.mubr.f32.mxu0 0.0
  %3437 = vmatmul.mubr.f32.gmra.mrb[0].mxu0 %v1258
  %v3438 = vpop.f32.mrb[0].mxu0
  %v3439 = vadd.f32 %v576, %v3438
  %v3440 = vpop.f32.mrb[0].mxu0
  %3441 = vmatprep.mubr.f32.mxu0 0.0
  %3442 = vmatmul.mubr.f32.gmra.mrb[0].mxu0 %v1261
  %v3443 = vpop.f32.mrb[0].mxu0
  %v3444 = vadd.f32 %v576, %v3443
  %v3445 = vpop.f32.mrb[0].mxu0
  %3446 = vmatprep.mubr.f32.mxu0 0.0
  %3447 = vmatmul.mubr.f32.gmra.mrb[0].mxu0 %v1264
  %v3448 = vpop.f32.mrb[0].mxu0
  %v3449 = vadd.f32 %v576, %v3448
  %v3450 = vpop.f32.mrb[0].mxu0
  %3451 = vmatprep.mubr.f32.mxu0 0.0
  %3452 = vmatmul.mubr.f32.gmra.mrb[0].mxu0 %v1267
  %v3453 = vpop.f32.mrb[0].mxu0
  %v3454 = vadd.f32 %v576, %v3453
  %v3455 = vpop.f32.mrb[0].mxu0
  %3456 = vmatprep.mubr.f32.mxu0 0.0
  %3457 = vmatmul.mubr.f32.gmra.mrb[0].mxu0 %v1270
  %v3458 = vpop.f32.mrb[0].mxu0
  %v3459 = vadd.f32 %v576, %v3458
  %v3460 = vpop.f32.mrb[0].mxu0
  %3461 = vmatprep.mubr.f32.mxu0 0.0
  %3462 = vmatmul.mubr.f32.gmra.mrb[0].mxu0 %v1273
  %v3463 = vpop.f32.mrb[0].mxu0
  %v3464 = vadd.f32 %v576, %v3463
  %v3465 = vpop.f32.mrb[0].mxu0
  %3466 = vmatprep.mubr.f32.mxu0 0.0
  %3467 = vmatmul.mubr.f32.gmra.mrb[0].mxu0 %v1276
  %v3468 = vpop.f32.mrb[0].mxu0
  %v3469 = vadd.f32 %v576, %v3468
  %v3470 = vpop.f32.mrb[0].mxu0
  %3471 = vmatprep.mubr.f32.mxu0 0.0
  %3472 = vmatmul.mubr.f32.gmra.mrb[0].mxu0 %v1279
  %v3473 = vpop.f32.mrb[0].mxu0
  %v3474 = vadd.f32 %v576, %v3473
  %v3475 = vpop.f32.mrb[0].mxu0
  %3476 = vmatprep.mubr.f32.mxu0 0.0
  %3477 = vmatmul.mubr.f32.gmra.mrb[0].mxu0 %v1282
  %v3478 = vpop.f32.mrb[0].mxu0
  %v3479 = vadd.f32 %v576, %v3478
  %v3480 = vpop.f32.mrb[0].mxu0
  %3481 = vmatprep.mubr.f32.mxu0 0.0
  %3482 = vmatmul.mubr.f32.gmra.mrb[0].mxu0 %v1285
  %v3483 = vpop.f32.mrb[0].mxu0
  %v3484 = vadd.f32 %v576, %v3483
  %v3485 = vpop.f32.mrb[0].mxu0
  %3486 = vmatprep.mubr.f32.mxu0 0.0
  %3487 = vmatmul.mubr.f32.gmra.mrb[0].mxu0 %v1288
  %v3488 = vpop.f32.mrb[0].mxu0
  %v3489 = vadd.f32 %v576, %v3488
  %v3490 = vpop.f32.mrb[0].mxu0
  %3491 = vmatprep.mubr.f32.mxu0 0.0
  %3492 = vmatmul.mubr.f32.gmra.mrb[0].mxu0 %v1291
  %v3493 = vpop.f32.mrb[0].mxu0
  %v3494 = vadd.f32 %v576, %v3493
  %v3495 = vpop.f32.mrb[0].mxu0
  %3496 = vmatprep.mubr.f32.mxu0 0.0
  %3497 = vmatmul.mubr.f32.gmra.mrb[0].mxu0 %v1294
  %v3498 = vpop.f32.mrb[0].mxu0
  %v3499 = vadd.f32 %v576, %v3498
  %v3500 = vpop.f32.mrb[0].mxu0
  %3501 = vmatprep.mubr.f32.mxu0 0.0
  %3502 = vmatmul.mubr.f32.gmra.mrb[0].mxu0 %v1297
  %v3503 = vpop.f32.mrb[0].mxu0
  %v3504 = vadd.f32 %v576, %v3503
  %v3505 = vpop.f32.mrb[0].mxu0
  %3506 = vmatprep.mubr.f32.mxu0 0.0
  %3507 = vmatmul.mubr.f32.gmra.mrb[0].mxu0 %v1300
  %v3508 = vpop.f32.mrb[0].mxu0
  %v3509 = vadd.f32 %v576, %v3508
  %v3510 = vpop.f32.mrb[0].mxu0
  %3511 = vmatprep.mubr.f32.mxu0 0.0
  %3512 = vmatmul.mubr.f32.gmra.mrb[0].mxu0 %v1303
  %v3513 = vpop.f32.mrb[0].mxu0
  %v3514 = vadd.f32 %v576, %v3513
  %v3515 = vpop.f32.mrb[0].mxu0
  %3516 = vmatprep.mubr.f32.mxu0 0.0
  %3517 = vmatmul.mubr.f32.gmra.mrb[0].mxu0 %v1306
  %v3518 = vpop.f32.mrb[0].mxu0
  %v3519 = vadd.f32 %v576, %v3518
  %v3520 = vpop.f32.mrb[0].mxu0
  %3521 = vmatprep.mubr.f32.mxu0 0.0
  %3522 = vmatmul.mubr.f32.gmra.mrb[0].mxu0 %v1309
  %v3523 = vpop.f32.mrb[0].mxu0
  %v3524 = vadd.f32 %v576, %v3523
  %v3525 = vpop.f32.mrb[0].mxu0
  %3526 = vmatprep.mubr.f32.mxu0 0.0
  %3527 = vmatmul.mubr.f32.gmra.mrb[0].mxu0 %v1312
  %v3528 = vpop.f32.mrb[0].mxu0
  %v3529 = vadd.f32 %v576, %v3528
  %v3530 = vpop.f32.mrb[0].mxu0
  %3531 = vmatprep.mubr.f32.mxu0 0.0
  %3532 = vmatmul.mubr.f32.gmra.mrb[0].mxu0 %v1315
  %v3533 = vpop.f32.mrb[0].mxu0
  %v3534 = vadd.f32 %v576, %v3533
  %v3535 = vpop.f32.mrb[0].mxu0
  %3536 = vmatprep.mubr.f32.mxu0 0.0
  %3537 = vmatmul.mubr.f32.gmra.mrb[0].mxu0 %v1318
  %v3538 = vpop.f32.mrb[0].mxu0
  %v3539 = vadd.f32 %v576, %v3538
  %v3540 = vpop.f32.mrb[0].mxu0
  %3541 = vmatprep.mubr.f32.mxu0 0.0
  %3542 = vmatmul.mubr.f32.gmra.mrb[0].mxu0 %v1321
  %v3543 = vpop.f32.mrb[0].mxu0
  %v3544 = vadd.f32 %v576, %v3543
  %v3545 = vpop.f32.mrb[0].mxu0
  %3546 = vmatprep.mubr.f32.mxu0 0.0
  %3547 = vmatmul.mubr.f32.gmra.mrb[0].mxu0 %v1324
  %v3548 = vpop.f32.mrb[0].mxu0
  %v3549 = vadd.f32 %v576, %v3548
  %v3550 = vpop.f32.mrb[0].mxu0
  %3551 = vmatprep.mubr.f32.mxu0 0.0
  %3552 = vmatmul.mubr.f32.gmra.mrb[0].mxu0 %v1327
  %v3553 = vpop.f32.mrb[0].mxu0
  %v3554 = vadd.f32 %v576, %v3553
  %v3555 = vpop.f32.mrb[0].mxu0
  %3556 = vmatprep.mubr.f32.mxu0 0.0
  %3557 = vmatmul.mubr.f32.gmra.mrb[0].mxu0 %v1330
  %v3558 = vpop.f32.mrb[0].mxu0
  %v3559 = vadd.f32 %v576, %v3558
  %v3560 = vpop.f32.mrb[0].mxu0
  %3561 = vmatprep.mubr.f32.mxu0 0.0
  %3562 = vmatmul.mubr.f32.gmra.mrb[0].mxu0 %v1333
  %v3563 = vpop.f32.mrb[0].mxu0
  %v3564 = vadd.f32 %v576, %v3563
  %v3565 = vpop.f32.mrb[0].mxu0
  %3566 = vmatprep.mubr.f32.mxu0 0.0
  %3567 = vmatmul.mubr.f32.gmra.mrb[0].mxu0 %v1336
  %v3568 = vpop.f32.mrb[0].mxu0
  %v3569 = vadd.f32 %v576, %v3568
  %v3570 = vpop.f32.mrb[0].mxu0
  %3571 = vmatprep.mubr.f32.mxu0 0.0
  %3572 = vmatmul.mubr.f32.gmra.mrb[0].mxu0 %v1339
  %v3573 = vpop.f32.mrb[0].mxu0
  %v3574 = vadd.f32 %v576, %v3573
  %v3575 = vpop.f32.mrb[0].mxu0
  %3576 = vmatprep.mubr.f32.mxu0 0.0
  %3577 = vmatmul.mubr.f32.gmra.mrb[0].mxu0 %v1342
  %v3578 = vpop.f32.mrb[0].mxu0
  %v3579 = vadd.f32 %v576, %v3578
  %v3580 = vpop.f32.mrb[0].mxu0
  %3581 = vmatprep.mubr.f32.mxu0 0.0
  %3582 = vmatmul.mubr.f32.gmra.mrb[0].mxu0 %v1345
  %v3583 = vpop.f32.mrb[0].mxu0
  %v3584 = vadd.f32 %v576, %v3583
  %v3585 = vpop.f32.mrb[0].mxu0
  %3586 = vmatprep.mubr.f32.mxu0 0.0
  %3587 = vmatmul.mubr.f32.gmra.mrb[0].mxu0 %v1348
  %v3588 = vpop.f32.mrb[0].mxu0
  %v3589 = vadd.f32 %v576, %v3588
  %v3590 = vpop.f32.mrb[0].mxu0
  %3591 = vmatprep.mubr.f32.mxu0 0.0
  %3592 = vmatmul.mubr.f32.gmra.mrb[0].mxu0 %v1351
  %v3593 = vpop.f32.mrb[0].mxu0
  %v3594 = vadd.f32 %v576, %v3593
  %v3595 = vpop.f32.mrb[0].mxu0
  %3596 = vmatprep.mubr.f32.mxu0 0.0
  %3597 = vmatmul.mubr.f32.gmra.mrb[0].mxu0 %v1354
  %v3598 = vpop.f32.mrb[0].mxu0
  %v3599 = vadd.f32 %v576, %v3598
  %v3600 = vpop.f32.mrb[0].mxu0
  %3601 = vmatprep.mubr.f32.mxu0 0.0
  %3602 = vmatmul.mubr.f32.gmra.mrb[0].mxu0 %v1357
  %v3603 = vpop.f32.mrb[0].mxu0
  %v3604 = vadd.f32 %v576, %v3603
  %v3605 = vpop.f32.mrb[0].mxu0
  %3606 = vmatprep.mubr.f32.mxu0 0.0
  %3607 = vmatmul.mubr.f32.gmra.mrb[0].mxu0 %v1360
  %v3608 = vpop.f32.mrb[0].mxu0
  %v3609 = vadd.f32 %v576, %v3608
  %v3610 = vpop.f32.mrb[0].mxu0
  %3611 = vmatprep.mubr.f32.mxu0 0.0
  %3612 = vmatmul.mubr.f32.gmra.mrb[0].mxu0 %v1363
  %v3613 = vpop.f32.mrb[0].mxu0
  %v3614 = vadd.f32 %v576, %v3613
  %v3615 = vpop.f32.mrb[0].mxu0
  %3616 = vmatprep.mubr.f32.mxu0 0.0
  %3617 = vmatmul.mubr.f32.gmra.mrb[0].mxu0 %v1366
  %v3618 = vpop.f32.mrb[0].mxu0
  %v3619 = vadd.f32 %v576, %v3618
  %v3620 = vpop.f32.mrb[0].mxu0
  %3621 = vmatprep.mubr.f32.mxu0 0.0
  %3622 = vmatmul.mubr.f32.gmra.mrb[0].mxu0 %v1369
  %v3623 = vpop.f32.mrb[0].mxu0
  %v3624 = vadd.f32 %v576, %v3623
  %v3625 = vpop.f32.mrb[0].mxu0
  %3626 = vmatprep.mubr.f32.mxu0 0.0
  %3627 = vmatmul.mubr.f32.gmra.mrb[0].mxu0 %v1372
  %v3628 = vpop.f32.mrb[0].mxu0
  %v3629 = vadd.f32 %v576, %v3628
  %v3630 = vpop.f32.mrb[0].mxu0
  %3631 = vmatprep.mubr.f32.mxu0 0.0
  %3632 = vmatmul.mubr.f32.gmra.mrb[0].mxu0 %v1375
  %v3633 = vpop.f32.mrb[0].mxu0
  %v3634 = vadd.f32 %v576, %v3633
  %v3635 = vpop.f32.mrb[0].mxu0
  %3636 = vmatprep.mubr.f32.mxu0 0.0
  %3637 = vmatmul.mubr.f32.gmra.mrb[0].mxu0 %v1378
  %v3638 = vpop.f32.mrb[0].mxu0
  %v3639 = vadd.f32 %v576, %v3638
  %v3640 = vpop.f32.mrb[0].mxu0
  %3641 = vmatprep.mubr.f32.mxu0 0.0
  %3642 = vmatmul.mubr.f32.gmra.mrb[0].mxu0 %v1381
  %v3643 = vpop.f32.mrb[0].mxu0
  %v3644 = vadd.f32 %v576, %v3643
  %v3645 = vpop.f32.mrb[0].mxu0
  %3646 = vmatprep.mubr.f32.mxu0 0.0
  %3647 = vmatmul.mubr.f32.gmra.mrb[0].mxu0 %v1384
  %v3648 = vpop.f32.mrb[0].mxu0
  %v3649 = vadd.f32 %v576, %v3648
  %v3650 = vpop.f32.mrb[0].mxu0
  %3651 = vmatprep.mubr.f32.mxu0 0.0
  %3652 = vmatmul.mubr.f32.gmra.mrb[0].mxu0 %v1387
  %v3653 = vpop.f32.mrb[0].mxu0
  %v3654 = vadd.f32 %v576, %v3653
  %v3655 = vpop.f32.mrb[0].mxu0
  %3656 = vmatprep.mubr.f32.mxu0 0.0
  %3657 = vmatmul.mubr.f32.gmra.mrb[0].mxu0 %v1390
  %v3658 = vpop.f32.mrb[0].mxu0
  %v3659 = vadd.f32 %v576, %v3658
  %v3660 = vpop.f32.mrb[0].mxu0
  %3661 = vmatprep.mubr.f32.mxu0 0.0
  %3662 = vmatmul.mubr.f32.gmra.mrb[0].mxu0 %v1393
  %v3663 = vpop.f32.mrb[0].mxu0
  %v3664 = vadd.f32 %v576, %v3663
  %v3665 = vpop.f32.mrb[0].mxu0
  %3666 = vmatprep.mubr.f32.mxu0 0.0
  %3667 = vmatmul.mubr.f32.gmra.mrb[0].mxu0 %v1396
  %v3668 = vpop.f32.mrb[0].mxu0
  %v3669 = vadd.f32 %v576, %v3668
  %v3670 = vpop.f32.mrb[0].mxu0
  %3671 = vmatprep.mubr.f32.mxu0 0.0
  %3672 = vmatmul.mubr.f32.gmra.mrb[0].mxu0 %v1399
  %v3673 = vpop.f32.mrb[0].mxu0
  %v3674 = vadd.f32 %v576, %v3673
  %v3675 = vpop.f32.mrb[0].mxu0
  %3676 = vmatprep.mubr.f32.mxu0 0.0
  %3677 = vmatmul.mubr.f32.gmra.mrb[0].mxu0 %v1402
  %v3678 = vpop.f32.mrb[0].mxu0
  %v3679 = vadd.f32 %v576, %v3678
  %v3680 = vpop.f32.mrb[0].mxu0
  %3681 = vmatprep.mubr.f32.mxu0 0.0
  %3682 = vmatmul.mubr.f32.gmra.mrb[0].mxu0 %v1405
  %v3683 = vpop.f32.mrb[0].mxu0
  %v3684 = vadd.f32 %v576, %v3683
  %v3685 = vpop.f32.mrb[0].mxu0
  %3686 = vmatprep.mubr.f32.mxu0 0.0
  %3687 = vmatmul.mubr.f32.gmra.mrb[0].mxu0 %v1408
  %v3688 = vpop.f32.mrb[0].mxu0
  %v3689 = vadd.f32 %v576, %v3688
  %v3690 = vpop.f32.mrb[0].mxu0
  %3691 = vmatprep.mubr.f32.mxu0 0.0
  %3692 = vmatmul.mubr.f32.gmra.mrb[0].mxu0 %v1411
  %v3693 = vpop.f32.mrb[0].mxu0
  %v3694 = vadd.f32 %v576, %v3693
  %v3695 = vpop.f32.mrb[0].mxu0
  %3696 = vmatprep.mubr.f32.mxu0 0.0
  %3697 = vmatmul.mubr.f32.gmra.mrb[0].mxu0 %v1414
  %v3698 = vpop.f32.mrb[0].mxu0
  %v3699 = vadd.f32 %v576, %v3698
  %v3700 = vpop.f32.mrb[0].mxu0
  %3701 = vmatprep.mubr.f32.mxu0 0.0
  %3702 = vmatmul.mubr.f32.gmra.mrb[0].mxu0 %v1417
  %v3703 = vpop.f32.mrb[0].mxu0
  %v3704 = vadd.f32 %v576, %v3703
  %v3705 = vpop.f32.mrb[0].mxu0
  %3706 = vmatprep.mubr.f32.mxu0 0.0
  %3707 = vmatmul.mubr.f32.gmra.mrb[0].mxu0 %v1420
  %v3708 = vpop.f32.mrb[0].mxu0
  %v3709 = vadd.f32 %v576, %v3708
  %v3710 = vpop.f32.mrb[0].mxu0
  %3711 = vmatprep.mubr.f32.mxu0 0.0
  %3712 = vmatmul.mubr.f32.gmra.mrb[0].mxu0 %v1423
  %v3713 = vpop.f32.mrb[0].mxu0
  %v3714 = vadd.f32 %v576, %v3713
  %v3715 = vpop.f32.mrb[0].mxu0
  %3716 = vmatprep.mubr.f32.mxu0 0.0
  %3717 = vmatmul.mubr.f32.gmra.mrb[0].mxu0 %v1426
  %v3718 = vpop.f32.mrb[0].mxu0
  %v3719 = vadd.f32 %v576, %v3718
  %v3720 = vpop.f32.mrb[0].mxu0
  %3721 = vmatprep.mubr.f32.mxu0 0.0
  %3722 = vmatmul.mubr.f32.gmra.mrb[0].mxu0 %v1429
  %v3723 = vpop.f32.mrb[0].mxu0
  %v3724 = vadd.f32 %v576, %v3723
  %v3725 = vpop.f32.mrb[0].mxu0
  %3726 = vmatprep.mubr.f32.mxu0 0.0
  %3727 = vmatmul.mubr.f32.gmra.mrb[0].mxu0 %v1432
  %v3728 = vpop.f32.mrb[0].mxu0
  %v3729 = vadd.f32 %v576, %v3728
  %v3730 = vpop.f32.mrb[0].mxu0
  %3731 = vmatprep.mubr.f32.mxu0 0.0
  %3732 = vmatmul.mubr.f32.gmra.mrb[0].mxu0 %v1435
  %v3733 = vpop.f32.mrb[0].mxu0
  %v3734 = vadd.f32 %v576, %v3733
  %v3735 = vpop.f32.mrb[0].mxu0
  %3736 = vmatprep.mubr.f32.mxu0 0.0
  %3737 = vmatmul.mubr.f32.gmra.mrb[0].mxu0 %v1438
  %v3738 = vpop.f32.mrb[0].mxu0
  %v3739 = vadd.f32 %v576, %v3738
  %v3740 = vpop.f32.mrb[0].mxu0
  %3741 = vmatprep.mubr.f32.mxu0 0.0
  %3742 = vmatmul.mubr.f32.gmra.mrb[0].mxu0 %v1441
  %v3743 = vpop.f32.mrb[0].mxu0
  %v3744 = vadd.f32 %v576, %v3743
  %v3745 = vpop.f32.mrb[0].mxu0
  %3746 = vmatprep.mubr.f32.mxu0 0.0
  %3747 = vmatmul.mubr.f32.gmra.mrb[0].mxu0 %v1444
  %v3748 = vpop.f32.mrb[0].mxu0
  %v3749 = vadd.f32 %v576, %v3748
  %v3750 = vpop.f32.mrb[0].mxu0
  %3751 = vmatprep.mubr.f32.mxu0 0.0
  %3752 = vmatmul.mubr.f32.gmra.mrb[0].mxu0 %v1447
  %v3753 = vpop.f32.mrb[0].mxu0
  %v3754 = vadd.f32 %v576, %v3753
  %v3755 = vpop.f32.mrb[0].mxu0
  %3756 = vmatprep.mubr.f32.mxu0 0.0
  %3757 = vmatmul.mubr.f32.gmra.mrb[0].mxu0 %v1450
  %v3758 = vpop.f32.mrb[0].mxu0
  %v3759 = vadd.f32 %v576, %v3758
  %v3760 = vpop.f32.mrb[0].mxu0
  %3761 = vmatprep.mubr.f32.mxu0 0.0
  %3762 = vmatmul.mubr.f32.gmra.mrb[0].mxu0 %v1453
  %v3763 = vpop.f32.mrb[0].mxu0
  %v3764 = vadd.f32 %v576, %v3763
  %v3765 = vpop.f32.mrb[0].mxu0
  %3766 = vmatprep.mubr.f32.mxu0 0.0
  %3767 = vmatmul.mubr.f32.gmra.mrb[0].mxu0 %v1456
  %v3768 = vpop.f32.mrb[0].mxu0
  %v3769 = vadd.f32 %v576, %v3768
  %v3770 = vpop.f32.mrb[0].mxu0
  %3771 = vmatprep.mubr.f32.mxu0 0.0
  %3772 = vmatmul.mubr.f32.gmra.mrb[0].mxu0 %v1459
  %v3773 = vpop.f32.mrb[0].mxu0
  %v3774 = vadd.f32 %v576, %v3773
  %v3775 = vpop.f32.mrb[0].mxu0
  %3776 = vmatprep.mubr.f32.mxu0 0.0
  %3777 = vmatmul.mubr.f32.gmra.mrb[0].mxu0 %v1462
  %v3778 = vpop.f32.mrb[0].mxu0
  %v3779 = vadd.f32 %v576, %v3778
  %v3780 = vpop.f32.mrb[0].mxu0
  %3781 = vmatprep.mubr.f32.mxu0 0.0
  %3782 = vmatmul.mubr.f32.gmra.mrb[0].mxu0 %v1465
  %v3783 = vpop.f32.mrb[0].mxu0
  %v3784 = vadd.f32 %v576, %v3783
  %v3785 = vpop.f32.mrb[0].mxu0
  %3786 = vmatprep.mubr.f32.mxu0 0.0
  %3787 = vmatmul.mubr.f32.gmra.mrb[0].mxu0 %v1468
  %v3788 = vpop.f32.mrb[0].mxu0
  %v3789 = vadd.f32 %v576, %v3788
  %v3790 = vpop.f32.mrb[0].mxu0
  %3791 = vmatprep.mubr.f32.mxu0 0.0
  %3792 = vmatmul.mubr.f32.gmra.mrb[0].mxu0 %v1471
  %v3793 = vpop.f32.mrb[0].mxu0
  %v3794 = vadd.f32 %v576, %v3793
  %v3795 = vpop.f32.mrb[0].mxu0
  %3796 = vmatprep.mubr.f32.mxu0 0.0
  %3797 = vmatmul.mubr.f32.gmra.mrb[0].mxu0 %v1474
  %v3798 = vpop.f32.mrb[0].mxu0
  %v3799 = vadd.f32 %v576, %v3798
  %v3800 = vpop.f32.mrb[0].mxu0
  %3801 = vmatprep.mubr.f32.mxu0 0.0
  %3802 = vmatmul.mubr.f32.gmra.mrb[0].mxu0 %v1477
  %v3803 = vpop.f32.mrb[0].mxu0
  %v3804 = vadd.f32 %v576, %v3803
  %v3805 = vpop.f32.mrb[0].mxu0
  %3806 = vmatprep.mubr.f32.mxu0 0.0
  %3807 = vmatmul.mubr.f32.gmra.mrb[0].mxu0 %v1480
  %v3808 = vpop.f32.mrb[0].mxu0
  %v3809 = vadd.f32 %v576, %v3808
  %v3810 = vpop.f32.mrb[0].mxu0
  %3811 = vmatprep.mubr.f32.mxu0 0.0
  %3812 = vmatmul.mubr.f32.gmra.mrb[0].mxu0 %v1483
  %v3813 = vpop.f32.mrb[0].mxu0
  %v3814 = vadd.f32 %v576, %v3813
  %v3815 = vpop.f32.mrb[0].mxu0
  %3816 = vmatprep.mubr.f32.mxu0 0.0
  %3817 = vmatmul.mubr.f32.gmra.mrb[0].mxu0 %v1486
  %v3818 = vpop.f32.mrb[0].mxu0
  %v3819 = vadd.f32 %v576, %v3818
  %v3820 = vpop.f32.mrb[0].mxu0
  %3821 = vmatprep.mubr.f32.mxu0 0.0
  %3822 = vmatmul.mubr.f32.gmra.mrb[0].mxu0 %v1489
  %v3823 = vpop.f32.mrb[0].mxu0
  %v3824 = vadd.f32 %v576, %v3823
  %v3825 = vpop.f32.mrb[0].mxu0
  %3826 = vmatprep.mubr.f32.mxu0 0.0
  %3827 = vmatmul.mubr.f32.gmra.mrb[0].mxu0 %v1492
  %v3828 = vpop.f32.mrb[0].mxu0
  %v3829 = vadd.f32 %v576, %v3828
  %v3830 = vpop.f32.mrb[0].mxu0
  %3831 = vmatprep.mubr.f32.mxu0 0.0
  %3832 = vmatmul.mubr.f32.gmra.mrb[0].mxu0 %v1495
  %v3833 = vpop.f32.mrb[0].mxu0
  %v3834 = vadd.f32 %v576, %v3833
  %v3835 = vpop.f32.mrb[0].mxu0
  %3836 = vmatprep.mubr.f32.mxu0 0.0
  %3837 = vmatmul.mubr.f32.gmra.mrb[0].mxu0 %v1498
  %v3838 = vpop.f32.mrb[0].mxu0
  %v3839 = vadd.f32 %v576, %v3838
  %v3840 = vpop.f32.mrb[0].mxu0
  %3841 = vmatprep.mubr.f32.mxu0 0.0
  %3842 = vmatmul.mubr.f32.gmra.mrb[0].mxu0 %v1501
  %v3843 = vpop.f32.mrb[0].mxu0
  %v3844 = vadd.f32 %v576, %v3843
  %v3845 = vpop.f32.mrb[0].mxu0
  %3846 = vmatprep.mubr.f32.mxu0 0.0
  %3847 = vmatmul.mubr.f32.gmra.mrb[0].mxu0 %v1504
  %v3848 = vpop.f32.mrb[0].mxu0
  %v3849 = vadd.f32 %v576, %v3848
  %v3850 = vpop.f32.mrb[0].mxu0
  %3851 = vmatprep.mubr.f32.mxu0 0.0
  %3852 = vmatmul.mubr.f32.gmra.mrb[0].mxu0 %v1507
  %v3853 = vpop.f32.mrb[0].mxu0
  %v3854 = vadd.f32 %v576, %v3853
  %v3855 = vpop.f32.mrb[0].mxu0
  %3856 = vmatprep.mubr.f32.mxu0 0.0
  %3857 = vmatmul.mubr.f32.gmra.mrb[0].mxu0 %v1510
  %v3858 = vpop.f32.mrb[0].mxu0
  %v3859 = vadd.f32 %v576, %v3858
  %v3860 = vpop.f32.mrb[0].mxu0
  %3861 = vmatprep.mubr.f32.mxu0 0.0
  %3862 = vmatmul.mubr.f32.gmra.mrb[0].mxu0 %v1513
  %v3863 = vpop.f32.mrb[0].mxu0
  %v3864 = vadd.f32 %v576, %v3863
  %v3865 = vpop.f32.mrb[0].mxu0
  %3866 = vmatprep.mubr.f32.mxu0 0.0
  %3867 = vmatmul.mubr.f32.gmra.mrb[0].mxu0 %v1516
  %v3868 = vpop.f32.mrb[0].mxu0
  %v3869 = vadd.f32 %v576, %v3868
  %v3870 = vpop.f32.mrb[0].mxu0
  %3871 = vmatprep.mubr.f32.mxu0 0.0
  %3872 = vmatmul.mubr.f32.gmra.mrb[0].mxu0 %v1519
  %v3873 = vpop.f32.mrb[0].mxu0
  %v3874 = vadd.f32 %v576, %v3873
  %v3875 = vpop.f32.mrb[0].mxu0
  %3876 = vmatprep.mubr.f32.mxu0 0.0
  %3877 = vmatmul.mubr.f32.gmra.mrb[0].mxu0 %v1522
  %v3878 = vpop.f32.mrb[0].mxu0
  %v3879 = vadd.f32 %v576, %v3878
  %v3880 = vpop.f32.mrb[0].mxu0
  %3881 = vmatprep.mubr.f32.mxu0 0.0
  %3882 = vmatmul.mubr.f32.gmra.mrb[0].mxu0 %v1525
  %v3883 = vpop.f32.mrb[0].mxu0
  %v3884 = vadd.f32 %v576, %v3883
  %v3885 = vpop.f32.mrb[0].mxu0
  %3886 = vmatprep.mubr.f32.mxu0 0.0
  %3887 = vmatmul.mubr.f32.gmra.mrb[0].mxu0 %v1528
  %v3888 = vpop.f32.mrb[0].mxu0
  %v3889 = vadd.f32 %v576, %v3888
  %v3890 = vpop.f32.mrb[0].mxu0
  %3891 = vmatprep.mubr.f32.mxu0 0.0
  %3892 = vmatmul.mubr.f32.gmra.mrb[0].mxu0 %v1531
  %v3893 = vpop.f32.mrb[0].mxu0
  %v3894 = vadd.f32 %v576, %v3893
  %v3895 = vpop.f32.mrb[0].mxu0
  %3896 = vmatprep.mubr.f32.mxu0 0.0
  %3897 = vmatmul.mubr.f32.gmra.mrb[0].mxu0 %v1534
  %v3898 = vpop.f32.mrb[0].mxu0
  %v3899 = vadd.f32 %v576, %v3898
  %v3900 = vpop.f32.mrb[0].mxu0
  %3901 = vmatprep.mubr.f32.mxu0 0.0
  %3902 = vmatmul.mubr.f32.gmra.mrb[0].mxu0 %v1537
  %v3903 = vpop.f32.mrb[0].mxu0
  %v3904 = vadd.f32 %v576, %v3903
  %v3905 = vpop.f32.mrb[0].mxu0
  %3906 = vmatprep.mubr.f32.mxu0 0.0
  %3907 = vmatmul.mubr.f32.gmra.mrb[0].mxu0 %v1540
  %v3908 = vpop.f32.mrb[0].mxu0
  %v3909 = vadd.f32 %v576, %v3908
  %v3910 = vpop.f32.mrb[0].mxu0
  %3911 = vmatprep.mubr.f32.mxu0 0.0
  %3912 = vmatmul.mubr.f32.gmra.mrb[0].mxu0 %v1543
  %v3913 = vpop.f32.mrb[0].mxu0
  %v3914 = vadd.f32 %v576, %v3913
  %v3915 = vpop.f32.mrb[0].mxu0
  %3916 = vmatprep.mubr.f32.mxu0 0.0
  %3917 = vmatmul.mubr.f32.gmra.mrb[0].mxu0 %v1546
  %v3918 = vpop.f32.mrb[0].mxu0
  %v3919 = vadd.f32 %v576, %v3918
  %v3920 = vpop.f32.mrb[0].mxu0
  %3921 = vmatprep.mubr.f32.mxu0 0.0
  %3922 = vmatmul.mubr.f32.gmra.mrb[0].mxu0 %v1549
  %v3923 = vpop.f32.mrb[0].mxu0
  %v3924 = vadd.f32 %v576, %v3923
  %v3925 = vpop.f32.mrb[0].mxu0
  %3926 = vmatprep.mubr.f32.mxu0 0.0
  %3927 = vmatmul.mubr.f32.gmra.mrb[0].mxu0 %v1552
  %v3928 = vpop.f32.mrb[0].mxu0
  %v3929 = vadd.f32 %v576, %v3928
  %v3930 = vpop.f32.mrb[0].mxu0
  %3931 = vmatprep.mubr.f32.mxu0 0.0
  %3932 = vmatmul.mubr.f32.gmra.mrb[0].mxu0 %v1555
  %v3933 = vpop.f32.mrb[0].mxu0
  %v3934 = vadd.f32 %v576, %v3933
  %v3935 = vpop.f32.mrb[0].mxu0
  %3936 = vmatprep.mubr.f32.mxu0 0.0
  %3937 = vmatmul.mubr.f32.gmra.mrb[0].mxu0 %v1558
  %v3938 = vpop.f32.mrb[0].mxu0
  %v3939 = vadd.f32 %v576, %v3938
  %v3940 = vpop.f32.mrb[0].mxu0
  %3941 = vmatprep.mubr.f32.mxu0 0.0
  %3942 = vmatmul.mubr.f32.gmra.mrb[0].mxu0 %v1561
  %v3943 = vpop.f32.mrb[0].mxu0
  %v3944 = vadd.f32 %v576, %v3943
  %v3945 = vpop.f32.mrb[0].mxu0
  %3946 = vmatprep.mubr.f32.mxu0 0.0
  %3947 = vmatmul.mubr.f32.gmra.mrb[0].mxu0 %v1564
  %v3948 = vpop.f32.mrb[0].mxu0
  %v3949 = vadd.f32 %v576, %v3948
  %v3950 = vpop.f32.mrb[0].mxu0
  %3951 = vmatprep.mubr.f32.mxu0 0.0
  %3952 = vmatmul.mubr.f32.gmra.mrb[0].mxu0 %v1567
  %v3953 = vpop.f32.mrb[0].mxu0
  %v3954 = vadd.f32 %v576, %v3953
  %v3955 = vpop.f32.mrb[0].mxu0
  %3956 = vmatprep.mubr.f32.mxu0 0.0
  %3957 = vmatmul.mubr.f32.gmra.mrb[0].mxu0 %v1570
  %v3958 = vpop.f32.mrb[0].mxu0
  %v3959 = vadd.f32 %v576, %v3958
  %v3960 = vpop.f32.mrb[0].mxu0
  %3961 = vmatprep.mubr.f32.mxu0 0.0
  %3962 = vmatmul.mubr.f32.gmra.mrb[0].mxu0 %v1573
  %v3963 = vpop.f32.mrb[0].mxu0
  %v3964 = vadd.f32 %v576, %v3963
  %v3965 = vpop.f32.mrb[0].mxu0
  %3966 = vmatprep.mubr.f32.mxu0 0.0
  %3967 = vmatmul.mubr.f32.gmra.mrb[0].mxu0 %v1576
  %v3968 = vpop.f32.mrb[0].mxu0
  %v3969 = vadd.f32 %v576, %v3968
  %v3970 = vpop.f32.mrb[0].mxu0
  %3971 = vmatprep.mubr.f32.mxu0 0.0
  %3972 = vmatmul.mubr.f32.gmra.mrb[0].mxu0 %v1579
  %v3973 = vpop.f32.mrb[0].mxu0
  %v3974 = vadd.f32 %v576, %v3973
  %v3975 = vpop.f32.mrb[0].mxu0
  %3976 = vmatprep.mubr.f32.mxu0 0.0
  %3977 = vmatmul.mubr.f32.gmra.mrb[0].mxu0 %v1582
  %v3978 = vpop.f32.mrb[0].mxu0
  %v3979 = vadd.f32 %v576, %v3978
  %v3980 = vpop.f32.mrb[0].mxu0
  %3981 = vmatprep.mubr.f32.mxu0 0.0
  %3982 = vmatmul.mubr.f32.gmra.mrb[0].mxu0 %v1585
  %v3983 = vpop.f32.mrb[0].mxu0
  %v3984 = vadd.f32 %v576, %v3983
  %v3985 = vpop.f32.mrb[0].mxu0
  %3986 = vmatprep.mubr.f32.mxu0 0.0
  %3987 = vmatmul.mubr.f32.gmra.mrb[0].mxu0 %v1588
  %v3988 = vpop.f32.mrb[0].mxu0
  %v3989 = vadd.f32 %v576, %v3988
  %v3990 = vpop.f32.mrb[0].mxu0
  %3991 = vmatprep.mubr.f32.mxu0 0.0
  %3992 = vmatmul.mubr.f32.gmra.mrb[0].mxu0 %v1591
  %v3993 = vpop.f32.mrb[0].mxu0
  %v3994 = vadd.f32 %v576, %v3993
  %v3995 = vpop.f32.mrb[0].mxu0
  %3996 = vmatprep.mubr.f32.mxu0 0.0
  %3997 = vmatmul.mubr.f32.gmra.mrb[0].mxu0 %v1594
  %v3998 = vpop.f32.mrb[0].mxu0
  %v3999 = vadd.f32 %v576, %v3998
  %v4000 = vpop.f32.mrb[0].mxu0
  %4001 = vmatprep.mubr.f32.mxu0 0.0
  %4002 = vmatmul.mubr.f32.gmra.mrb[0].mxu0 %v1597
  %v4003 = vpop.f32.mrb[0].mxu0
  %v4004 = vadd.f32 %v576, %v4003
  %v4005 = vpop.f32.mrb[0].mxu0
  %4006 = vmatprep.mubr.f32.mxu0 0.0
  %4007 = vmatmul.mubr.f32.gmra.mrb[0].mxu0 %v1600
  %v4008 = vpop.f32.mrb[0].mxu0
  %v4009 = vadd.f32 %v576, %v4008
  %v4010 = vpop.f32.mrb[0].mxu0
  %4011 = vmatprep.mubr.f32.mxu0 0.0
  %4012 = vmatmul.mubr.f32.gmra.mrb[0].mxu0 %v1603
  %v4013 = vpop.f32.mrb[0].mxu0
  %v4014 = vadd.f32 %v576, %v4013
  %v4015 = vpop.f32.mrb[0].mxu0
  %4016 = vmatprep.mubr.f32.mxu0 0.0
  %4017 = vmatmul.mubr.f32.gmra.mrb[0].mxu0 %v1606
  %v4018 = vpop.f32.mrb[0].mxu0
  %v4019 = vadd.f32 %v576, %v4018
  %v4020 = vpop.f32.mrb[0].mxu0
  %4021 = vmatprep.mubr.f32.mxu0 0.0
  %4022 = vmatmul.mubr.f32.gmra.mrb[0].mxu0 %v1609
  %v4023 = vpop.f32.mrb[0].mxu0
  %v4024 = vadd.f32 %v576, %v4023
  %v4025 = vpop.f32.mrb[0].mxu0
  %4026 = vmatprep.mubr.f32.mxu0 0.0
  %4027 = vmatmul.mubr.f32.gmra.mrb[0].mxu0 %v1612
  %v4028 = vpop.f32.mrb[0].mxu0
  %v4029 = vadd.f32 %v576, %v4028
  %v4030 = vpop.f32.mrb[0].mxu0
  %4031 = vmatprep.mubr.f32.mxu0 0.0
  %4032 = vmatmul.mubr.f32.gmra.mrb[0].mxu0 %v1615
  %v4033 = vpop.f32.mrb[0].mxu0
  %v4034 = vadd.f32 %v576, %v4033
  %v4035 = vpop.f32.mrb[0].mxu0
  %4036 = vmatprep.mubr.f32.mxu0 0.0
  %4037 = vmatmul.mubr.f32.gmra.mrb[0].mxu0 %v1618
  %v4038 = vpop.f32.mrb[0].mxu0
  %v4039 = vadd.f32 %v576, %v4038
  %v4040 = vpop.f32.mrb[0].mxu0
  %4041 = vmatprep.mubr.f32.mxu0 0.0
  %4042 = vmatmul.mubr.f32.gmra.mrb[0].mxu0 %v1621
  %v4043 = vpop.f32.mrb[0].mxu0
  %v4044 = vadd.f32 %v576, %v4043
  %v4045 = vpop.f32.mrb[0].mxu0
  %4046 = vmatprep.mubr.f32.mxu0 0.0
  %4047 = vmatmul.mubr.f32.gmra.mrb[0].mxu0 %v1624
  %v4048 = vpop.f32.mrb[0].mxu0
  %v4049 = vadd.f32 %v576, %v4048
  %v4050 = vpop.f32.mrb[0].mxu0
  %4051 = vmatprep.mubr.f32.mxu0 0.0
  %4052 = vmatmul.mubr.f32.gmra.mrb[0].mxu0 %v1627
  %v4053 = vpop.f32.mrb[0].mxu0
  %v4054 = vadd.f32 %v576, %v4053
  %v4055 = vpop.f32.mrb[0].mxu0
  %4056 = vmatprep.mubr.f32.mxu0 0.0
  %4057 = vmatmul.mubr.f32.gmra.mrb[0].mxu0 %v1630
  %v4058 = vpop.f32.mrb[0].mxu0
  %v4059 = vadd.f32 %v576, %v4058
  %v4060 = vpop.f32.mrb[0].mxu0
  %4061 = vmatprep.mubr.f32.mxu0 0.0
  %4062 = vmatmul.mubr.f32.gmra.mrb[0].mxu0 %v1633
  %v4063 = vpop.f32.mrb[0].mxu0
  %v4064 = vadd.f32 %v576, %v4063
  %v4065 = vpop.f32.mrb[0].mxu0
  %4066 = vmatprep.mubr.f32.mxu0 0.0
  %4067 = vmatmul.mubr.f32.gmra.mrb[0].mxu0 %v1636
  %v4068 = vpop.f32.mrb[0].mxu0
  %v4069 = vadd.f32 %v576, %v4068
  %v4070 = vpop.f32.mrb[0].mxu0
  %4071 = vmatprep.mubr.f32.mxu0 0.0
  %4072 = vmatmul.mubr.f32.gmra.mrb[0].mxu0 %v1639
  %v4073 = vpop.f32.mrb[0].mxu0
  %v4074 = vadd.f32 %v576, %v4073
  %v4075 = vpop.f32.mrb[0].mxu0
  %4076 = vmatprep.mubr.f32.mxu0 0.0
  %4077 = vmatmul.mubr.f32.gmra.mrb[0].mxu0 %v1642
  %v4078 = vpop.f32.mrb[0].mxu0
  %v4079 = vadd.f32 %v576, %v4078
  %v4080 = vpop.f32.mrb[0].mxu0
  %4081 = vmatprep.mubr.f32.mxu0 0.0
  %4082 = vmatmul.mubr.f32.gmra.mrb[0].mxu0 %v1645
  %v4083 = vpop.f32.mrb[0].mxu0
  %v4084 = vadd.f32 %v576, %v4083
  %v4085 = vpop.f32.mrb[0].mxu0
  %4086 = vmatprep.mubr.f32.mxu0 0.0
  %4087 = vmatmul.mubr.f32.gmra.mrb[0].mxu0 %v1648
  %v4088 = vpop.f32.mrb[0].mxu0
  %v4089 = vadd.f32 %v576, %v4088
  %v4090 = vpop.f32.mrb[0].mxu0
  %4091 = vmatprep.mubr.f32.mxu0 0.0
  %4092 = vmatmul.mubr.f32.gmra.mrb[0].mxu0 %v1651
  %v4093 = vpop.f32.mrb[0].mxu0
  %v4094 = vadd.f32 %v576, %v4093
  %v4095 = vpop.f32.mrb[0].mxu0
  %4096 = vmatprep.mubr.f32.mxu0 0.0
  %4097 = vmatmul.mubr.f32.gmra.mrb[0].mxu0 %v1654
  %v4098 = vpop.f32.mrb[0].mxu0
  %v4099 = vadd.f32 %v576, %v4098
  %v4100 = vpop.f32.mrb[0].mxu0
  %4101 = vmatprep.mubr.f32.mxu0 0.0
  %4102 = vmatmul.mubr.f32.gmra.mrb[0].mxu0 %v1657
  %v4103 = vpop.f32.mrb[0].mxu0
  %v4104 = vadd.f32 %v576, %v4103
  %v4105 = vpop.f32.mrb[0].mxu0
  %4106 = vmatprep.mubr.f32.mxu0 0.0
  %4107 = vmatmul.mubr.f32.gmra.mrb[0].mxu0 %v1660
  %v4108 = vpop.f32.mrb[0].mxu0
  %v4109 = vadd.f32 %v576, %v4108
  %v4110 = vpop.f32.mrb[0].mxu0
  %4111 = vmatprep.mubr.f32.mxu0 0.0
  %4112 = vmatmul.mubr.f32.gmra.mrb[0].mxu0 %v1663
  %v4113 = vpop.f32.mrb[0].mxu0
  %v4114 = vadd.f32 %v576, %v4113
  %v4115 = vpop.f32.mrb[0].mxu0
  %4116 = vmatprep.mubr.f32.mxu0 0.0
  %4117 = vmatmul.mubr.f32.gmra.mrb[0].mxu0 %v1666
  %v4118 = vpop.f32.mrb[0].mxu0
  %v4119 = vadd.f32 %v576, %v4118
  %v4120 = vpop.f32.mrb[0].mxu0
  %4121 = vmatprep.mubr.f32.mxu0 0.0
  %4122 = vmatmul.mubr.f32.gmra.mrb[0].mxu0 %v1669
  %v4123 = vpop.f32.mrb[0].mxu0
  %v4124 = vadd.f32 %v576, %v4123
  %v4125 = vpop.f32.mrb[0].mxu0
  %4126 = vmatprep.mubr.f32.mxu0 0.0
  %4127 = vmatmul.mubr.f32.gmra.mrb[0].mxu0 %v1672
  %v4128 = vpop.f32.mrb[0].mxu0
  %v4129 = vadd.f32 %v576, %v4128
  %v4130 = vpop.f32.mrb[0].mxu0
  %4131 = vmatprep.mubr.f32.mxu0 0.0
  %4132 = vmatmul.mubr.f32.gmra.mrb[0].mxu0 %v1675
  %v4133 = vpop.f32.mrb[0].mxu0
  %v4134 = vadd.f32 %v576, %v4133
  %v4135 = vpop.f32.mrb[0].mxu0
  %4136 = vmatprep.mubr.f32.mxu0 0.0
  %4137 = vmatmul.mubr.f32.gmra.mrb[0].mxu0 %v1678
  %v4138 = vpop.f32.mrb[0].mxu0
  %v4139 = vadd.f32 %v576, %v4138
  %v4140 = vpop.f32.mrb[0].mxu0
  %4141 = vmatprep.mubr.f32.mxu0 0.0
  %4142 = vmatmul.mubr.f32.gmra.mrb[0].mxu0 %v1681
  %v4143 = vpop.f32.mrb[0].mxu0
  %v4144 = vadd.f32 %v576, %v4143
  %v4145 = vpop.f32.mrb[0].mxu0
  %4146 = vmatprep.mubr.f32.mxu0 0.0
  %4147 = vmatmul.mubr.f32.gmra.mrb[0].mxu0 %v1684
  %v4148 = vpop.f32.mrb[0].mxu0
  %v4149 = vadd.f32 %v576, %v4148
  %v4150 = vpop.f32.mrb[0].mxu0
  %4151 = vmatprep.mubr.f32.mxu0 0.0
  %4152 = vmatmul.mubr.f32.gmra.mrb[0].mxu0 %v1687
  %v4153 = vpop.f32.mrb[0].mxu0
  %v4154 = vadd.f32 %v576, %v4153
  %v4155 = vpop.f32.mrb[0].mxu0
  %4156 = vmatprep.mubr.f32.mxu0 0.0
  %4157 = vmatmul.mubr.f32.gmra.mrb[0].mxu0 %v1690
  %v4158 = vpop.f32.mrb[0].mxu0
  %v4159 = vadd.f32 %v576, %v4158
  %v4160 = vpop.f32.mrb[0].mxu0
  %4161 = vmatprep.mubr.f32.mxu0 0.0
  %4162 = vmatmul.mubr.f32.gmra.mrb[0].mxu0 %v1693
  %v4163 = vpop.f32.mrb[0].mxu0
  %v4164 = vadd.f32 %v576, %v4163
  %v4165 = vpop.f32.mrb[0].mxu0
  %4166 = vmatprep.mubr.f32.mxu0 0.0
  %4167 = vmatmul.mubr.f32.gmra.mrb[0].mxu0 %v1696
  %v4168 = vpop.f32.mrb[0].mxu0
  %v4169 = vadd.f32 %v576, %v4168
  %v4170 = vpop.f32.mrb[0].mxu0
  %4171 = vmatprep.mubr.f32.mxu0 0.0
  %4172 = vmatmul.mubr.f32.gmra.mrb[0].mxu0 %v1699
  %v4173 = vpop.f32.mrb[0].mxu0
  %v4174 = vadd.f32 %v576, %v4173
  %v4175 = vpop.f32.mrb[0].mxu0
  %4176 = vmatprep.mubr.f32.mxu0 0.0
  %4177 = vmatmul.mubr.f32.gmra.mrb[0].mxu0 %v1702
  %v4178 = vpop.f32.mrb[0].mxu0
  %v4179 = vadd.f32 %v576, %v4178
  %v4180 = vpop.f32.mrb[0].mxu0
  %4181 = vmatprep.mubr.f32.mxu0 0.0
  %4182 = vmatmul.mubr.f32.gmra.mrb[0].mxu0 %v1705
  %v4183 = vpop.f32.mrb[0].mxu0
  %v4184 = vadd.f32 %v576, %v4183
  %v4185 = vpop.f32.mrb[0].mxu0
  %4186 = vmatprep.mubr.f32.mxu0 0.0
  %4187 = vmatmul.mubr.f32.gmra.mrb[0].mxu0 %v1708
  %v4188 = vpop.f32.mrb[0].mxu0
  %v4189 = vadd.f32 %v576, %v4188
  %v4190 = vpop.f32.mrb[0].mxu0
  %4191 = vmatprep.mubr.f32.mxu0 0.0
  %4192 = vmatmul.mubr.f32.gmra.mrb[0].mxu0 %v1711
  %v4193 = vpop.f32.mrb[0].mxu0
  %v4194 = vadd.f32 %v576, %v4193
  %v4195 = vpop.f32.mrb[0].mxu0
  %4196 = vmatprep.mubr.f32.mxu0 0.0
  %4197 = vmatmul.mubr.f32.gmra.mrb[0].mxu0 %v1714
  %v4198 = vpop.f32.mrb[0].mxu0
  %v4199 = vadd.f32 %v576, %v4198
  %v4200 = vpop.f32.mrb[0].mxu0
  %4201 = vmatprep.mubr.f32.mxu0 0.0
  %4202 = vmatmul.mubr.f32.gmra.mrb[0].mxu0 %v1717
  %v4203 = vpop.f32.mrb[0].mxu0
  %v4204 = vadd.f32 %v576, %v4203
  %v4205 = vpop.f32.mrb[0].mxu0
  %4206 = vmatprep.mubr.f32.mxu0 0.0
  %4207 = vmatmul.mubr.f32.gmra.mrb[0].mxu0 %v1720
  %v4208 = vpop.f32.mrb[0].mxu0
  %v4209 = vadd.f32 %v576, %v4208
  %v4210 = vpop.f32.mrb[0].mxu0
  %4211 = vmatprep.mubr.f32.mxu0 0.0
  %4212 = vmatmul.mubr.f32.gmra.mrb[0].mxu0 %v1723
  %v4213 = vpop.f32.mrb[0].mxu0
  %v4214 = vadd.f32 %v576, %v4213
  %v4215 = vpop.f32.mrb[0].mxu0
  %4216 = vmatprep.mubr.f32.mxu0 0.0
  %4217 = vmatmul.mubr.f32.gmra.mrb[0].mxu0 %v1726
  %v4218 = vpop.f32.mrb[0].mxu0
  %v4219 = vadd.f32 %v576, %v4218
  %v4220 = vpop.f32.mrb[0].mxu0
  %4221 = vmatprep.mubr.f32.mxu0 0.0
  %4222 = vmatmul.mubr.f32.gmra.mrb[0].mxu0 %v1729
  %v4223 = vpop.f32.mrb[0].mxu0
  %v4224 = vadd.f32 %v576, %v4223
  %v4225 = vpop.f32.mrb[0].mxu0
  %4226 = vmatprep.mubr.f32.mxu0 0.0
  %4227 = vmatmul.mubr.f32.gmra.mrb[0].mxu0 %v1732
  %v4228 = vpop.f32.mrb[0].mxu0
  %v4229 = vadd.f32 %v576, %v4228
  %v4230 = vpop.f32.mrb[0].mxu0
  %4231 = vmatprep.mubr.f32.mxu0 0.0
  %4232 = vmatmul.mubr.f32.gmra.mrb[0].mxu0 %v1735
  %v4233 = vpop.f32.mrb[0].mxu0
  %v4234 = vadd.f32 %v576, %v4233
  %v4235 = vpop.f32.mrb[0].mxu0
  %4236 = vmatprep.mubr.f32.mxu0 0.0
  %4237 = vmatmul.mubr.f32.gmra.mrb[0].mxu0 %v1738
  %v4238 = vpop.f32.mrb[0].mxu0
  %v4239 = vadd.f32 %v576, %v4238
  %v4240 = vpop.f32.mrb[0].mxu0
  %4241 = vmatprep.mubr.f32.mxu0 0.0
  %4242 = vmatmul.mubr.f32.gmra.mrb[0].mxu0 %v1741
  %v4243 = vpop.f32.mrb[0].mxu0
  %v4244 = vadd.f32 %v576, %v4243
  %v4245 = vpop.f32.mrb[0].mxu0
  %4246 = vmatprep.mubr.f32.mxu0 0.0
  %4247 = vmatmul.mubr.f32.gmra.mrb[0].mxu0 %v1744
  %v4248 = vpop.f32.mrb[0].mxu0
  %v4249 = vadd.f32 %v576, %v4248
  %v4250 = vpop.f32.mrb[0].mxu0
  %4251 = vmatprep.mubr.f32.mxu0 0.0
  %4252 = vmatmul.mubr.f32.gmra.mrb[0].mxu0 %v1747
  %v4253 = vpop.f32.mrb[0].mxu0
  %v4254 = vadd.f32 %v576, %v4253
  %v4255 = vpop.f32.mrb[0].mxu0
  %4256 = vmatprep.mubr.f32.mxu0 0.0
  %4257 = vmatmul.mubr.f32.gmra.mrb[0].mxu0 %v1750
  %v4258 = vpop.f32.mrb[0].mxu0
  %v4259 = vadd.f32 %v576, %v4258
  %v4260 = vpop.f32.mrb[0].mxu0
  %4261 = vmatprep.mubr.f32.mxu0 0.0
  %4262 = vmatmul.mubr.f32.gmra.mrb[0].mxu0 %v1753
  %v4263 = vpop.f32.mrb[0].mxu0
  %v4264 = vadd.f32 %v576, %v4263
  %v4265 = vpop.f32.mrb[0].mxu0
  %4266 = vmatprep.mubr.f32.mxu0 0.0
  %4267 = vmatmul.mubr.f32.gmra.mrb[0].mxu0 %v1756
  %v4268 = vpop.f32.mrb[0].mxu0
  %v4269 = vadd.f32 %v576, %v4268
  %v4270 = vpop.f32.mrb[0].mxu0
  %4271 = vmatprep.mubr.f32.mxu0 0.0
  %4272 = vmatmul.mubr.f32.gmra.mrb[0].mxu0 %v1759
  %v4273 = vpop.f32.mrb[0].mxu0
  %v4274 = vadd.f32 %v576, %v4273
  %v4275 = vpop.f32.mrb[0].mxu0
  %4276 = vmatprep.mubr.f32.mxu0 0.0
  %4277 = vmatmul.mubr.f32.gmra.mrb[0].mxu0 %v1762
  %v4278 = vpop.f32.mrb[0].mxu0
  %v4279 = vadd.f32 %v576, %v4278
  %v4280 = vpop.f32.mrb[0].mxu0
  %4281 = vmatprep.mubr.f32.mxu0 0.0
  %4282 = vmatmul.mubr.f32.gmra.mrb[0].mxu0 %v1765
  %v4283 = vpop.f32.mrb[0].mxu0
  %v4284 = vadd.f32 %v576, %v4283
  %v4285 = vpop.f32.mrb[0].mxu0
  %4286 = vmatprep.mubr.f32.mxu0 0.0
  %4287 = vmatmul.mubr.f32.gmra.mrb[0].mxu0 %v1768
  %v4288 = vpop.f32.mrb[0].mxu0
  %v4289 = vadd.f32 %v576, %v4288
  %v4290 = vpop.f32.mrb[0].mxu0
  %4291 = vmatprep.mubr.f32.mxu0 0.0
  %4292 = vmatmul.mubr.f32.gmra.mrb[0].mxu0 %v1771
  %v4293 = vpop.f32.mrb[0].mxu0
  %v4294 = vadd.f32 %v576, %v4293
  %v4295 = vpop.f32.mrb[0].mxu0
  %4296 = vmatprep.mubr.f32.mxu0 0.0
  %4297 = vmatmul.mubr.f32.gmra.mrb[0].mxu0 %v1774
  %v4298 = vpop.f32.mrb[0].mxu0
  %v4299 = vadd.f32 %v576, %v4298
  %v4300 = vpop.f32.mrb[0].mxu0
  %4301 = vmatprep.mubr.f32.mxu0 0.0
  %4302 = vmatmul.mubr.f32.gmra.mrb[0].mxu0 %v1777
  %v4303 = vpop.f32.mrb[0].mxu0
  %v4304 = vadd.f32 %v576, %v4303
  %v4305 = vpop.f32.mrb[0].mxu0
  %4306 = vmatprep.mubr.f32.mxu0 0.0
  %4307 = vmatmul.mubr.f32.gmra.mrb[0].mxu0 %v1780
  %v4308 = vpop.f32.mrb[0].mxu0
  %v4309 = vadd.f32 %v576, %v4308
  %v4310 = vpop.f32.mrb[0].mxu0
  %4311 = vmatprep.mubr.f32.mxu0 0.0
  %4312 = vmatmul.mubr.f32.gmra.mrb[0].mxu0 %v1783
  %v4313 = vpop.f32.mrb[0].mxu0
  %v4314 = vadd.f32 %v576, %v4313
  %v4315 = vpop.f32.mrb[0].mxu0
  %4316 = vmatprep.mubr.f32.mxu0 0.0
  %4317 = vmatmul.mubr.f32.gmra.mrb[0].mxu0 %v1786
  %v4318 = vpop.f32.mrb[0].mxu0
  %v4319 = vadd.f32 %v576, %v4318
  %v4320 = vpop.f32.mrb[0].mxu0
  %4321 = vmatprep.mubr.f32.mxu0 0.0
  %4322 = vmatmul.mubr.f32.gmra.mrb[0].mxu0 %v1789
  %v4323 = vpop.f32.mrb[0].mxu0
  %v4324 = vadd.f32 %v576, %v4323
  %v4325 = vpop.f32.mrb[0].mxu0
  %4326 = vmatprep.mubr.f32.mxu0 0.0
  %4327 = vmatmul.mubr.f32.gmra.mrb[0].mxu0 %v1792
  %v4328 = vpop.f32.mrb[0].mxu0
  %v4329 = vadd.f32 %v576, %v4328
  %v4330 = vpop.f32.mrb[0].mxu0
  %4331 = vmatprep.mubr.f32.mxu0 0.0
  %4332 = vmatmul.mubr.f32.gmra.mrb[0].mxu0 %v1795
  %v4333 = vpop.f32.mrb[0].mxu0
  %v4334 = vadd.f32 %v576, %v4333
  %v4335 = vpop.f32.mrb[0].mxu0
  %4336 = vmatprep.mubr.f32.mxu0 0.0
  %4337 = vmatmul.mubr.f32.gmra.mrb[0].mxu0 %v1798
  %v4338 = vpop.f32.mrb[0].mxu0
  %v4339 = vadd.f32 %v576, %v4338
  %v4340 = vpop.f32.mrb[0].mxu0
  %4341 = vmatprep.mubr.f32.mxu0 0.0
  %4342 = vmatmul.mubr.f32.gmra.mrb[0].mxu0 %v1801
  %v4343 = vpop.f32.mrb[0].mxu0
  %v4344 = vadd.f32 %v576, %v4343
  %v4345 = vpop.f32.mrb[0].mxu0
  %4346 = vmatprep.mubr.f32.mxu0 0.0
  %4347 = vmatmul.mubr.f32.gmra.mrb[0].mxu0 %v1804
  %v4348 = vpop.f32.mrb[0].mxu0
  %v4349 = vadd.f32 %v576, %v4348
  %v4350 = vpop.f32.mrb[0].mxu0
  %4351 = vmatprep.mubr.f32.mxu0 0.0
  %4352 = vmatmul.mubr.f32.gmra.mrb[0].mxu0 %v1807
  %v4353 = vpop.f32.mrb[0].mxu0
  %v4354 = vadd.f32 %v576, %v4353
  %v4355 = vpop.f32.mrb[0].mxu0
  %4356 = vmatprep.mubr.f32.mxu0 0.0
  %4357 = vmatmul.mubr.f32.gmra.mrb[0].mxu0 %v1810
  %v4358 = vpop.f32.mrb[0].mxu0
  %v4359 = vadd.f32 %v576, %v4358
  %v4360 = vpop.f32.mrb[0].mxu0
  %4361 = vmatprep.mubr.f32.mxu0 0.0
  %4362 = vmatmul.mubr.f32.gmra.mrb[0].mxu0 %v1813
  %v4363 = vpop.f32.mrb[0].mxu0
  %v4364 = vadd.f32 %v576, %v4363
  %v4365 = vpop.f32.mrb[0].mxu0
  %4366 = vmatprep.mubr.f32.mxu0 0.0
  %4367 = vmatmul.mubr.f32.gmra.mrb[0].mxu0 %v1816
  %v4368 = vpop.f32.mrb[0].mxu0
  %v4369 = vadd.f32 %v576, %v4368
  %v4370 = vpop.f32.mrb[0].mxu0
  %4371 = vmatprep.mubr.f32.mxu0 0.0
  %4372 = vmatmul.mubr.f32.gmra.mrb[0].mxu0 %v1819
  %v4373 = vpop.f32.mrb[0].mxu0
  %v4374 = vadd.f32 %v576, %v4373
  %v4375 = vpop.f32.mrb[0].mxu0
  %4376 = vmatprep.mubr.f32.mxu0 0.0
  %4377 = vmatmul.mubr.f32.gmra.mrb[0].mxu0 %v1822
  %v4378 = vpop.f32.mrb[0].mxu0
  %v4379 = vadd.f32 %v576, %v4378
  %v4380 = vpop.f32.mrb[0].mxu0
  %4381 = vmatprep.mubr.f32.mxu0 0.0
  %4382 = vmatmul.mubr.f32.gmra.mrb[0].mxu0 %v1825
  %v4383 = vpop.f32.mrb[0].mxu0
  %v4384 = vadd.f32 %v576, %v4383
  %v4385 = vpop.f32.mrb[0].mxu0
  %4386 = vmatprep.mubr.f32.mxu0 0.0
  %4387 = vmatmul.mubr.f32.gmra.mrb[0].mxu0 %v1828
  %v4388 = vpop.f32.mrb[0].mxu0
  %v4389 = vadd.f32 %v576, %v4388
  %v4390 = vpop.f32.mrb[0].mxu0
  %4391 = vmatprep.mubr.f32.mxu0 0.0
  %4392 = vmatmul.mubr.f32.gmra.mrb[0].mxu0 %v1831
  %v4393 = vpop.f32.mrb[0].mxu0
  %v4394 = vadd.f32 %v576, %v4393
  %v4395 = vpop.f32.mrb[0].mxu0
  %4396 = vmatprep.mubr.f32.mxu0 0.0
  %4397 = vmatmul.mubr.f32.gmra.mrb[0].mxu0 %v1834
  %v4398 = vpop.f32.mrb[0].mxu0
  %v4399 = vadd.f32 %v576, %v4398
  %v4400 = vpop.f32.mrb[0].mxu0
  %4401 = vmatprep.mubr.f32.mxu0 0.0
  %4402 = vmatmul.mubr.f32.gmra.mrb[0].mxu0 %v1837
  %v4403 = vpop.f32.mrb[0].mxu0
  %v4404 = vadd.f32 %v576, %v4403
  %v4405 = vpop.f32.mrb[0].mxu0
  %4406 = vmatprep.mubr.f32.mxu0 0.0
  %4407 = vmatmul.mubr.f32.gmra.mrb[0].mxu0 %v1840
  %v4408 = vpop.f32.mrb[0].mxu0
  %v4409 = vadd.f32 %v576, %v4408
  %v4410 = vpop.f32.mrb[0].mxu0
  %4411 = vmatprep.mubr.f32.mxu0 0.0
  %4412 = vmatmul.mubr.f32.gmra.mrb[0].mxu0 %v1843
  %v4413 = vpop.f32.mrb[0].mxu0
  %v4414 = vadd.f32 %v576, %v4413
  %v4415 = vpop.f32.mrb[0].mxu0
  %4416 = vmatprep.mubr.f32.mxu0 0.0
  %4417 = vmatmul.mubr.f32.gmra.mrb[0].mxu0 %v1846
  %v4418 = vpop.f32.mrb[0].mxu0
  %v4419 = vadd.f32 %v576, %v4418
  %v4420 = vpop.f32.mrb[0].mxu0
  %4421 = vmatprep.mubr.f32.mxu0 0.0
  %4422 = vmatmul.mubr.f32.gmra.mrb[0].mxu0 %v1849
  %v4423 = vpop.f32.mrb[0].mxu0
  %v4424 = vadd.f32 %v576, %v4423
  %v4425 = vpop.f32.mrb[0].mxu0
  %4426 = vmatprep.mubr.f32.mxu0 0.0
  %4427 = vmatmul.mubr.f32.gmra.mrb[0].mxu0 %v1852
  %v4428 = vpop.f32.mrb[0].mxu0
  %v4429 = vadd.f32 %v576, %v4428
  %v4430 = vpop.f32.mrb[0].mxu0
  %4431 = vmatprep.mubr.f32.mxu0 0.0
  %4432 = vmatmul.mubr.f32.gmra.mrb[0].mxu0 %v1855
  %v4433 = vpop.f32.mrb[0].mxu0
  %v4434 = vadd.f32 %v576, %v4433
  %v4435 = vpop.f32.mrb[0].mxu0
  %4436 = vmatprep.mubr.f32.mxu0 0.0
  %4437 = vmatmul.mubr.f32.gmra.mrb[0].mxu0 %v1858
  %v4438 = vpop.f32.mrb[0].mxu0
  %v4439 = vadd.f32 %v576, %v4438
  %v4440 = vpop.f32.mrb[0].mxu0
  %4441 = vmatprep.mubr.f32.mxu0 0.0
  %4442 = vmatmul.mubr.f32.gmra.mrb[0].mxu0 %v1861
  %v4443 = vpop.f32.mrb[0].mxu0
  %v4444 = vadd.f32 %v576, %v4443
  %v4445 = vpop.f32.mrb[0].mxu0
  %4446 = vmatprep.mubr.f32.mxu0 0.0
  %4447 = vmatmul.mubr.f32.gmra.mrb[0].mxu0 %v1864
  %v4448 = vpop.f32.mrb[0].mxu0
  %v4449 = vadd.f32 %v576, %v4448
  %v4450 = vpop.f32.mrb[0].mxu0
  %4451 = vmatprep.mubr.f32.mxu0 0.0
  %4452 = vmatmul.mubr.f32.gmra.mrb[0].mxu0 %v1867
  %v4453 = vpop.f32.mrb[0].mxu0
  %v4454 = vadd.f32 %v576, %v4453
  %v4455 = vpop.f32.mrb[0].mxu0
  %4456 = vmatprep.mubr.f32.mxu0 0.0
  %4457 = vmatmul.mubr.f32.gmra.mrb[0].mxu0 %v1870
  %v4458 = vpop.f32.mrb[0].mxu0
  %v4459 = vadd.f32 %v576, %v4458
  %v4460 = vpop.f32.mrb[0].mxu0
  %4461 = vmatprep.mubr.f32.mxu0 0.0
  %4462 = vmatmul.mubr.f32.gmra.mrb[0].mxu0 %v1873
  %v4463 = vpop.f32.mrb[0].mxu0
  %v4464 = vadd.f32 %v576, %v4463
  %v4465 = vpop.f32.mrb[0].mxu0
  %4466 = vmatprep.mubr.f32.mxu0 0.0
  %4467 = vmatmul.mubr.f32.gmra.mrb[0].mxu0 %v1876
  %v4468 = vpop.f32.mrb[0].mxu0
  %v4469 = vadd.f32 %v576, %v4468
  %v4470 = vpop.f32.mrb[0].mxu0
  %4471 = vmatprep.mubr.f32.mxu0 0.0
  %4472 = vmatmul.mubr.f32.gmra.mrb[0].mxu0 %v1879
  %v4473 = vpop.f32.mrb[0].mxu0
  %v4474 = vadd.f32 %v576, %v4473
  %v4475 = vpop.f32.mrb[0].mxu0
  %4476 = vmatprep.mubr.f32.mxu0 0.0
  %4477 = vmatmul.mubr.f32.gmra.mrb[0].mxu0 %v1882
  %v4478 = vpop.f32.mrb[0].mxu0
  %v4479 = vadd.f32 %v576, %v4478
  %v4480 = vpop.f32.mrb[0].mxu0
  %4481 = vmatprep.mubr.f32.mxu0 0.0
  %4482 = vmatmul.mubr.f32.gmra.mrb[0].mxu0 %v1885
  %v4483 = vpop.f32.mrb[0].mxu0
  %v4484 = vadd.f32 %v576, %v4483
  %v4485 = vpop.f32.mrb[0].mxu0
  %4486 = vmatprep.mubr.f32.mxu0 0.0
  %4487 = vmatmul.mubr.f32.gmra.mrb[0].mxu0 %v1888
  %v4488 = vpop.f32.mrb[0].mxu0
  %v4489 = vadd.f32 %v576, %v4488
  %v4490 = vpop.f32.mrb[0].mxu0
  %4491 = vmatprep.mubr.f32.mxu0 0.0
  %4492 = vmatmul.mubr.f32.gmra.mrb[0].mxu0 %v1891
  %v4493 = vpop.f32.mrb[0].mxu0
  %v4494 = vadd.f32 %v576, %v4493
  %v4495 = vpop.f32.mrb[0].mxu0
  %4496 = vmatprep.mubr.f32.mxu0 0.0
  %4497 = vmatmul.mubr.f32.gmra.mrb[0].mxu0 %v1894
  %v4498 = vpop.f32.mrb[0].mxu0
  %v4499 = vadd.f32 %v576, %v4498
  %v4500 = vpop.f32.mrb[0].mxu0
  %4501 = vmatprep.mubr.f32.mxu0 0.0
  %4502 = vmatmul.mubr.f32.gmra.mrb[0].mxu0 %v1897
  %v4503 = vpop.f32.mrb[0].mxu0
  %v4504 = vadd.f32 %v576, %v4503
  %v4505 = vpop.f32.mrb[0].mxu0
  %4506 = vmatprep.mubr.f32.mxu0 0.0
  %4507 = vmatmul.mubr.f32.gmra.mrb[0].mxu0 %v1900
  %v4508 = vpop.f32.mrb[0].mxu0
  %v4509 = vadd.f32 %v576, %v4508
  %v4510 = vpop.f32.mrb[0].mxu0
  %4511 = vmatprep.mubr.f32.mxu0 0.0
  %4512 = vmatmul.mubr.f32.gmra.mrb[0].mxu0 %v1903
  %v4513 = vpop.f32.mrb[0].mxu0
  %v4514 = vadd.f32 %v576, %v4513
  %v4515 = vpop.f32.mrb[0].mxu0
  %4516 = vmatprep.mubr.f32.mxu0 0.0
  %4517 = vmatmul.mubr.f32.gmra.mrb[0].mxu0 %v1906
  %v4518 = vpop.f32.mrb[0].mxu0
  %v4519 = vadd.f32 %v576, %v4518
  %v4520 = vpop.f32.mrb[0].mxu0
  %4521 = vmatprep.mubr.f32.mxu0 0.0
  %4522 = vmatmul.mubr.f32.gmra.mrb[0].mxu0 %v1909
  %v4523 = vpop.f32.mrb[0].mxu0
  %v4524 = vadd.f32 %v576, %v4523
  %v4525 = vpop.f32.mrb[0].mxu0
  %4526 = vmatprep.mubr.f32.mxu0 0.0
  %4527 = vmatmul.mubr.f32.gmra.mrb[0].mxu0 %v1912
  %v4528 = vpop.f32.mrb[0].mxu0
  %v4529 = vadd.f32 %v576, %v4528
  %v4530 = vpop.f32.mrb[0].mxu0
  %4531 = vmatprep.mubr.f32.mxu0 0.0
  %4532 = vmatmul.mubr.f32.gmra.mrb[0].mxu0 %v1915
  %v4533 = vpop.f32.mrb[0].mxu0
  %v4534 = vadd.f32 %v576, %v4533
  %v4535 = vpop.f32.mrb[0].mxu0
  %4536 = vmatprep.mubr.f32.mxu0 0.0
  %4537 = vmatmul.mubr.f32.gmra.mrb[0].mxu0 %v1918
  %v4538 = vpop.f32.mrb[0].mxu0
  %v4539 = vadd.f32 %v576, %v4538
  %v4540 = vpop.f32.mrb[0].mxu0
  %4541 = vmatprep.mubr.f32.mxu0 0.0
  %4542 = vmatmul.mubr.f32.gmra.mrb[0].mxu0 %v1921
  %v4543 = vpop.f32.mrb[0].mxu0
  %v4544 = vadd.f32 %v576, %v4543
  %v4545 = vpop.f32.mrb[0].mxu0
  %4546 = vmatprep.mubr.f32.mxu0 0.0
  %4547 = vmatmul.mubr.f32.gmra.mrb[0].mxu0 %v1924
  %v4548 = vpop.f32.mrb[0].mxu0
  %v4549 = vadd.f32 %v576, %v4548
  %v4550 = vpop.f32.mrb[0].mxu0
  %4551 = vmatprep.mubr.f32.mxu0 0.0
  %4552 = vmatmul.mubr.f32.gmra.mrb[0].mxu0 %v1927
  %v4553 = vpop.f32.mrb[0].mxu0
  %v4554 = vadd.f32 %v576, %v4553
  %v4555 = vpop.f32.mrb[0].mxu0
  %4556 = vmatprep.mubr.f32.mxu0 0.0
  %4557 = vmatmul.mubr.f32.gmra.mrb[0].mxu0 %v1930
  %v4558 = vpop.f32.mrb[0].mxu0
  %v4559 = vadd.f32 %v576, %v4558
  %v4560 = vpop.f32.mrb[0].mxu0
  %4561 = vmatprep.mubr.f32.mxu0 0.0
  %4562 = vmatmul.mubr.f32.gmra.mrb[0].mxu0 %v1933
  %v4563 = vpop.f32.mrb[0].mxu0
  %v4564 = vadd.f32 %v576, %v4563
  %v4565 = vpop.f32.mrb[0].mxu0
  %4566 = vmatprep.mubr.f32.mxu0 0.0
  %4567 = vmatmul.mubr.f32.gmra.mrb[0].mxu0 %v1936
  %v4568 = vpop.f32.mrb[0].mxu0
  %v4569 = vadd.f32 %v576, %v4568
  %v4570 = vpop.f32.mrb[0].mxu0
  %4571 = vmatprep.mubr.f32.mxu0 0.0
  %4572 = vmatmul.mubr.f32.gmra.mrb[0].mxu0 %v1939
  %v4573 = vpop.f32.mrb[0].mxu0
  %v4574 = vadd.f32 %v576, %v4573
  %v4575 = vpop.f32.mrb[0].mxu0
  %4576 = vmatprep.mubr.f32.mxu0 0.0
  %4577 = vmatmul.mubr.f32.gmra.mrb[0].mxu0 %v1942
  %v4578 = vpop.f32.mrb[0].mxu0
  %v4579 = vadd.f32 %v576, %v4578
  %v4580 = vpop.f32.mrb[0].mxu0
  %4581 = vmatprep.mubr.f32.mxu0 0.0
  %4582 = vmatmul.mubr.f32.gmra.mrb[0].mxu0 %v1945
  %v4583 = vpop.f32.mrb[0].mxu0
  %v4584 = vadd.f32 %v576, %v4583
  %v4585 = vpop.f32.mrb[0].mxu0
  %4586 = vmatprep.mubr.f32.mxu0 0.0
  %4587 = vmatmul.mubr.f32.gmra.mrb[0].mxu0 %v1948
  %v4588 = vpop.f32.mrb[0].mxu0
  %v4589 = vadd.f32 %v576, %v4588
  %v4590 = vpop.f32.mrb[0].mxu0
  %4591 = vmatprep.mubr.f32.mxu0 0.0
  %4592 = vmatmul.mubr.f32.gmra.mrb[0].mxu0 %v1951
  %v4593 = vpop.f32.mrb[0].mxu0
  %v4594 = vadd.f32 %v576, %v4593
  %v4595 = vpop.f32.mrb[0].mxu0
  %4596 = vmatprep.mubr.f32.mxu0 0.0
  %4597 = vmatmul.mubr.f32.gmra.mrb[0].mxu0 %v1954
  %v4598 = vpop.f32.mrb[0].mxu0
  %v4599 = vadd.f32 %v576, %v4598
  %v4600 = vpop.f32.mrb[0].mxu0
  %4601 = vmatprep.mubr.f32.mxu0 0.0
  %4602 = vmatmul.mubr.f32.gmra.mrb[0].mxu0 %v1957
  %v4603 = vpop.f32.mrb[0].mxu0
  %v4604 = vadd.f32 %v576, %v4603
  %v4605 = vpop.f32.mrb[0].mxu0
  %4606 = vmatprep.mubr.f32.mxu0 0.0
  %4607 = vmatmul.mubr.f32.gmra.mrb[0].mxu0 %v1960
  %v4608 = vpop.f32.mrb[0].mxu0
  %v4609 = vadd.f32 %v576, %v4608
  %v4610 = vpop.f32.mrb[0].mxu0
  %4611 = vmatprep.mubr.f32.mxu0 0.0
  %4612 = vmatmul.mubr.f32.gmra.mrb[0].mxu0 %v1963
  %v4613 = vpop.f32.mrb[0].mxu0
  %v4614 = vadd.f32 %v576, %v4613
  %v4615 = vpop.f32.mrb[0].mxu0
  %4616 = vmatprep.mubr.f32.mxu0 0.0
  %4617 = vmatmul.mubr.f32.gmra.mrb[0].mxu0 %v1966
  %v4618 = vpop.f32.mrb[0].mxu0
  %v4619 = vadd.f32 %v576, %v4618
  %v4620 = vpop.f32.mrb[0].mxu0
  %4621 = vmatprep.mubr.f32.mxu0 0.0
  %4622 = vmatmul.mubr.f32.gmra.mrb[0].mxu0 %v1969
  %v4623 = vpop.f32.mrb[0].mxu0
  %v4624 = vadd.f32 %v576, %v4623
  %v4625 = vpop.f32.mrb[0].mxu0
  %4626 = vmatprep.mubr.f32.mxu0 0.0
  %4627 = vmatmul.mubr.f32.gmra.mrb[0].mxu0 %v1972
  %v4628 = vpop.f32.mrb[0].mxu0
  %v4629 = vadd.f32 %v576, %v4628
  %v4630 = vpop.f32.mrb[0].mxu0
  %4631 = vmatprep.mubr.f32.mxu0 0.0
  %4632 = vmatmul.mubr.f32.gmra.mrb[0].mxu0 %v1975
  %v4633 = vpop.f32.mrb[0].mxu0
  %v4634 = vadd.f32 %v576, %v4633
  %v4635 = vpop.f32.mrb[0].mxu0
  %4636 = vmatprep.mubr.f32.mxu0 0.0
  %4637 = vmatmul.mubr.f32.gmra.mrb[0].mxu0 %v1978
  %v4638 = vpop.f32.mrb[0].mxu0
  %v4639 = vadd.f32 %v576, %v4638
  %v4640 = vpop.f32.mrb[0].mxu0
  %4641 = vmatprep.mubr.f32.mxu0 0.0
  %4642 = vmatmul.mubr.f32.gmra.mrb[0].mxu0 %v1981
  %v4643 = vpop.f32.mrb[0].mxu0
  %v4644 = vadd.f32 %v576, %v4643
  %v4645 = vpop.f32.mrb[0].mxu0
  %4646 = vmatprep.mubr.f32.mxu0 0.0
  %4647 = vmatmul.mubr.f32.gmra.mrb[0].mxu0 %v1984
  %v4648 = vpop.f32.mrb[0].mxu0
  %v4649 = vadd.f32 %v576, %v4648
  %v4650 = vpop.f32.mrb[0].mxu0
  %4651 = vmatprep.mubr.f32.mxu0 0.0
  %4652 = vmatmul.mubr.f32.gmra.mrb[0].mxu0 %v1987
  %v4653 = vpop.f32.mrb[0].mxu0
  %v4654 = vadd.f32 %v576, %v4653
  %v4655 = vpop.f32.mrb[0].mxu0
  %4656 = vmatprep.mubr.f32.mxu0 0.0
  %4657 = vmatmul.mubr.f32.gmra.mrb[0].mxu0 %v1990
  %v4658 = vpop.f32.mrb[0].mxu0
  %v4659 = vadd.f32 %v576, %v4658
  %v4660 = vpop.f32.mrb[0].mxu0
  %4661 = vmatprep.mubr.f32.mxu0 0.0
  %4662 = vmatmul.mubr.f32.gmra.mrb[0].mxu0 %v1993
  %v4663 = vpop.f32.mrb[0].mxu0
  %v4664 = vadd.f32 %v576, %v4663
  %v4665 = vpop.f32.mrb[0].mxu0
  %4666 = vmatprep.mubr.f32.mxu0 0.0
  %4667 = vmatmul.mubr.f32.gmra.mrb[0].mxu0 %v1996
  %v4668 = vpop.f32.mrb[0].mxu0
  %v4669 = vadd.f32 %v576, %v4668
  %v4670 = vpop.f32.mrb[0].mxu0
  %4671 = vmatprep.mubr.f32.mxu0 0.0
  %4672 = vmatmul.mubr.f32.gmra.mrb[0].mxu0 %v1999
  %v4673 = vpop.f32.mrb[0].mxu0
  %v4674 = vadd.f32 %v576, %v4673
  %v4675 = vpop.f32.mrb[0].mxu0
  %4676 = vmatprep.mubr.f32.mxu0 0.0
  %4677 = vmatmul.mubr.f32.gmra.mrb[0].mxu0 %v2002
  %v4678 = vpop.f32.mrb[0].mxu0
  %v4679 = vadd.f32 %v576, %v4678
  %v4680 = vpop.f32.mrb[0].mxu0
  %4681 = vmatprep.mubr.f32.mxu0 0.0
  %4682 = vmatmul.mubr.f32.gmra.mrb[0].mxu0 %v2005
  %v4683 = vpop.f32.mrb[0].mxu0
  %v4684 = vadd.f32 %v576, %v4683
  %v4685 = vpop.f32.mrb[0].mxu0
  %4686 = vmatprep.mubr.f32.mxu0 0.0
  %4687 = vmatmul.mubr.f32.gmra.mrb[0].mxu0 %v2008
  %v4688 = vpop.f32.mrb[0].mxu0
  %v4689 = vadd.f32 %v576, %v4688
  %v4690 = vpop.f32.mrb[0].mxu0
  %4691 = vmatprep.mubr.f32.mxu0 0.0
  %4692 = vmatmul.mubr.f32.gmra.mrb[0].mxu0 %v2011
  %v4693 = vpop.f32.mrb[0].mxu0
  %v4694 = vadd.f32 %v576, %v4693
  %v4695 = vpop.f32.mrb[0].mxu0
  %4696 = vmatprep.mubr.f32.mxu0 0.0
  %4697 = vmatmul.mubr.f32.gmra.mrb[0].mxu0 %v2014
  %v4698 = vpop.f32.mrb[0].mxu0
  %v4699 = vadd.f32 %v576, %v4698
  %v4700 = vpop.f32.mrb[0].mxu0
  %4701 = vmatprep.mubr.f32.mxu0 0.0
  %4702 = vmatmul.mubr.f32.gmra.mrb[0].mxu0 %v2017
  %v4703 = vpop.f32.mrb[0].mxu0
  %v4704 = vadd.f32 %v576, %v4703
  %v4705 = vpop.f32.mrb[0].mxu0
  %4706 = vmatprep.mubr.f32.mxu0 0.0
  %4707 = vmatmul.mubr.f32.gmra.mrb[0].mxu0 %v2020
  %v4708 = vpop.f32.mrb[0].mxu0
  %v4709 = vadd.f32 %v576, %v4708
  %v4710 = vpop.f32.mrb[0].mxu0
  %4711 = vmatprep.mubr.f32.mxu0 0.0
  %4712 = vmatmul.mubr.f32.gmra.mrb[0].mxu0 %v2023
  %v4713 = vpop.f32.mrb[0].mxu0
  %v4714 = vadd.f32 %v576, %v4713
  %v4715 = vpop.f32.mrb[0].mxu0
  %4716 = vmatprep.mubr.f32.mxu0 0.0
  %4717 = vmatmul.mubr.f32.gmra.mrb[0].mxu0 %v2026
  %v4718 = vpop.f32.mrb[0].mxu0
  %v4719 = vadd.f32 %v576, %v4718
  %v4720 = vpop.f32.mrb[0].mxu0
  %4721 = vmatprep.mubr.f32.mxu0 0.0
  %4722 = vmatmul.mubr.f32.gmra.mrb[0].mxu0 %v2029
  %v4723 = vpop.f32.mrb[0].mxu0
  %v4724 = vadd.f32 %v576, %v4723
  %v4725 = vpop.f32.mrb[0].mxu0
  %4726 = vmatprep.mubr.f32.mxu0 0.0
  %4727 = vmatmul.mubr.f32.gmra.mrb[0].mxu0 %v2032
  %v4728 = vpop.f32.mrb[0].mxu0
  %v4729 = vadd.f32 %v576, %v4728
  %v4730 = vpop.f32.mrb[0].mxu0
  %4731 = vmatprep.mubr.f32.mxu0 0.0
  %4732 = vmatmul.mubr.f32.gmra.mrb[0].mxu0 %v2035
  %v4733 = vpop.f32.mrb[0].mxu0
  %v4734 = vadd.f32 %v576, %v4733
  %v4735 = vpop.f32.mrb[0].mxu0
  %4736 = vmatprep.mubr.f32.mxu0 0.0
  %4737 = vmatmul.mubr.f32.gmra.mrb[0].mxu0 %v2038
  %v4738 = vpop.f32.mrb[0].mxu0
  %v4739 = vadd.f32 %v576, %v4738
  %v4740 = vpop.f32.mrb[0].mxu0
  %4741 = vmatprep.mubr.f32.mxu0 0.0
  %4742 = vmatmul.mubr.f32.gmra.mrb[0].mxu0 %v2041
  %v4743 = vpop.f32.mrb[0].mxu0
  %v4744 = vadd.f32 %v576, %v4743
  %v4745 = vpop.f32.mrb[0].mxu0
  %4746 = vmatprep.mubr.f32.mxu0 0.0
  %4747 = vmatmul.mubr.f32.gmra.mrb[0].mxu0 %v2044
  %v4748 = vpop.f32.mrb[0].mxu0
  %v4749 = vadd.f32 %v576, %v4748
  %v4750 = vpop.f32.mrb[0].mxu0
  %4751 = vmatprep.mubr.f32.mxu0 0.0
  %4752 = vmatmul.mubr.f32.gmra.mrb[0].mxu0 %v2047
  %v4753 = vpop.f32.mrb[0].mxu0
  %v4754 = vadd.f32 %v576, %v4753
  %v4755 = vpop.f32.mrb[0].mxu0
  %4756 = vmatprep.mubr.f32.mxu0 0.0
  %4757 = vmatmul.mubr.f32.gmra.mrb[0].mxu0 %v2050
  %v4758 = vpop.f32.mrb[0].mxu0
  %v4759 = vadd.f32 %v576, %v4758
  %v4760 = vpop.f32.mrb[0].mxu0
  %4761 = vmatprep.mubr.f32.mxu0 0.0
  %4762 = vmatmul.mubr.f32.gmra.mrb[0].mxu0 %v2053
  %v4763 = vpop.f32.mrb[0].mxu0
  %v4764 = vadd.f32 %v576, %v4763
  %v4765 = vpop.f32.mrb[0].mxu0
  %4766 = vmatprep.mubr.f32.mxu0 0.0
  %4767 = vmatmul.mubr.f32.gmra.mrb[0].mxu0 %v2056
  %v4768 = vpop.f32.mrb[0].mxu0
  %v4769 = vadd.f32 %v576, %v4768
  %v4770 = vpop.f32.mrb[0].mxu0
  %4771 = vmatprep.mubr.f32.mxu0 0.0
  %4772 = vmatmul.mubr.f32.gmra.mrb[0].mxu0 %v2059
  %v4773 = vpop.f32.mrb[0].mxu0
  %v4774 = vadd.f32 %v576, %v4773
  %v4775 = vpop.f32.mrb[0].mxu0
  %4776 = vmatprep.mubr.f32.mxu0 0.0
  %4777 = vmatmul.mubr.f32.gmra.mrb[0].mxu0 %v2062
  %v4778 = vpop.f32.mrb[0].mxu0
  %v4779 = vadd.f32 %v576, %v4778
  %v4780 = vpop.f32.mrb[0].mxu0
  %4781 = vmatprep.mubr.f32.mxu0 0.0
  %4782 = vmatmul.mubr.f32.gmra.mrb[0].mxu0 %v2065
  %v4783 = vpop.f32.mrb[0].mxu0
  %v4784 = vadd.f32 %v576, %v4783
  %v4785 = vpop.f32.mrb[0].mxu0
  %4786 = vmatprep.mubr.f32.mxu0 0.0
  %4787 = vmatmul.mubr.f32.gmra.mrb[0].mxu0 %v2068
  %v4788 = vpop.f32.mrb[0].mxu0
  %v4789 = vadd.f32 %v576, %v4788
  %v4790 = vpop.f32.mrb[0].mxu0
  %4791 = vmatprep.mubr.f32.mxu0 0.0
  %4792 = vmatmul.mubr.f32.gmra.mrb[0].mxu0 %v2071
  %v4793 = vpop.f32.mrb[0].mxu0
  %v4794 = vadd.f32 %v576, %v4793
  %v4795 = vpop.f32.mrb[0].mxu0
  %4796 = vmatprep.mubr.f32.mxu0 0.0
  %4797 = vmatmul.mubr.f32.gmra.mrb[0].mxu0 %v2074
  %v4798 = vpop.f32.mrb[0].mxu0
  %v4799 = vadd.f32 %v576, %v4798
  %v4800 = vpop.f32.mrb[0].mxu0
  %4801 = vmatprep.mubr.f32.mxu0 0.0
  %4802 = vmatmul.mubr.f32.gmra.mrb[0].mxu0 %v2077
  %v4803 = vpop.f32.mrb[0].mxu0
  %v4804 = vadd.f32 %v576, %v4803
  %v4805 = vpop.f32.mrb[0].mxu0
  %4806 = vmatprep.mubr.f32.mxu0 0.0
  %4807 = vmatmul.mubr.f32.gmra.mrb[0].mxu0 %v2080
  %v4808 = vpop.f32.mrb[0].mxu0
  %v4809 = vadd.f32 %v576, %v4808
  %v4810 = vpop.f32.mrb[0].mxu0
  %4811 = vmatprep.mubr.f32.mxu0 0.0
  %4812 = vmatmul.mubr.f32.gmra.mrb[0].mxu0 %v2083
  %v4813 = vpop.f32.mrb[0].mxu0
  %v4814 = vadd.f32 %v576, %v4813
  %v4815 = vpop.f32.mrb[0].mxu0
  %4816 = vmatprep.mubr.f32.mxu0 0.0
  %4817 = vmatmul.mubr.f32.gmra.mrb[0].mxu0 %v2086
  %v4818 = vpop.f32.mrb[0].mxu0
  %v4819 = vadd.f32 %v576, %v4818
  %v4820 = vpop.f32.mrb[0].mxu0
  %4821 = vmatprep.mubr.f32.mxu0 0.0
  %4822 = vmatmul.mubr.f32.gmra.mrb[0].mxu0 %v2089
  %v4823 = vpop.f32.mrb[0].mxu0
  %v4824 = vadd.f32 %v576, %v4823
  %v4825 = vpop.f32.mrb[0].mxu0
  %4826 = vmatprep.mubr.f32.mxu0 0.0
  %4827 = vmatmul.mubr.f32.gmra.mrb[0].mxu0 %v2092
  %v4828 = vpop.f32.mrb[0].mxu0
  %v4829 = vadd.f32 %v576, %v4828
  %v4830 = vpop.f32.mrb[0].mxu0
  %4831 = vmatprep.mubr.f32.mxu0 0.0
  %4832 = vmatmul.mubr.f32.gmra.mrb[0].mxu0 %v2095
  %v4833 = vpop.f32.mrb[0].mxu0
  %v4834 = vadd.f32 %v576, %v4833
  %v4835 = vpop.f32.mrb[0].mxu0
  %4836 = vmatprep.mubr.f32.mxu0 0.0
  %4837 = vmatmul.mubr.f32.gmra.mrb[0].mxu0 %v2098
  %v4838 = vpop.f32.mrb[0].mxu0
  %v4839 = vadd.f32 %v576, %v4838
  %v4840 = vpop.f32.mrb[0].mxu0
  %4841 = vmatprep.mubr.f32.mxu0 0.0
  %4842 = vmatmul.mubr.f32.gmra.mrb[0].mxu0 %v2101
  %v4843 = vpop.f32.mrb[0].mxu0
  %v4844 = vadd.f32 %v576, %v4843
  %v4845 = vpop.f32.mrb[0].mxu0
  %4846 = vmatprep.mubr.f32.mxu0 0.0
  %4847 = vmatmul.mubr.f32.gmra.mrb[0].mxu0 %v2104
  %v4848 = vpop.f32.mrb[0].mxu0
  %v4849 = vadd.f32 %v576, %v4848
  %v4850 = vpop.f32.mrb[0].mxu0
  %4851 = vmatprep.mubr.f32.mxu0 0.0
  %4852 = vmatmul.mubr.f32.gmra.mrb[0].mxu0 %v2107
  %v4853 = vpop.f32.mrb[0].mxu0
  %v4854 = vadd.f32 %v576, %v4853
  %v4855 = vpop.f32.mrb[0].mxu0
  %4856 = vmatprep.mubr.f32.mxu0 0.0
  %4857 = vmatmul.mubr.f32.gmra.mrb[0].mxu0 %v2110
  %v4858 = vpop.f32.mrb[0].mxu0
  %v4859 = vadd.f32 %v576, %v4858
  %v4860 = vpop.f32.mrb[0].mxu0
  %4861 = vmatprep.mubr.f32.mxu0 0.0
  %4862 = vmatmul.mubr.f32.gmra.mrb[0].mxu0 %v2113
  %v4863 = vpop.f32.mrb[0].mxu0
  %v4864 = vadd.f32 %v576, %v4863
  %v4865 = vpop.f32.mrb[0].mxu0
  %4866 = vmatprep.mubr.f32.mxu0 0.0
  %4867 = vmatmul.mubr.f32.gmra.mrb[0].mxu0 %v2116
  %v4868 = vpop.f32.mrb[0].mxu0
  %v4869 = vadd.f32 %v576, %v4868
  %v4870 = vpop.f32.mrb[0].mxu0
  %4871 = vmatprep.mubr.f32.mxu0 0.0
  %4872 = vmatmul.mubr.f32.gmra.mrb[0].mxu0 %v2119
  %v4873 = vpop.f32.mrb[0].mxu0
  %v4874 = vadd.f32 %v576, %v4873
  %v4875 = vpop.f32.mrb[0].mxu0
  %4876 = vmatprep.mubr.f32.mxu0 0.0
  %4877 = vmatmul.mubr.f32.gmra.mrb[0].mxu0 %v2122
  %v4878 = vpop.f32.mrb[0].mxu0
  %v4879 = vadd.f32 %v576, %v4878
  %v4880 = vpop.f32.mrb[0].mxu0
  %4881 = vmatprep.mubr.f32.mxu0 0.0
  %4882 = vmatmul.mubr.f32.gmra.mrb[0].mxu0 %v2125
  %v4883 = vpop.f32.mrb[0].mxu0
  %v4884 = vadd.f32 %v576, %v4883
  %v4885 = vpop.f32.mrb[0].mxu0
  %4886 = vmatprep.mubr.f32.mxu0 0.0
  %4887 = vmatmul.mubr.f32.gmra.mrb[0].mxu0 %v2128
  %v4888 = vpop.f32.mrb[0].mxu0
  %v4889 = vadd.f32 %v576, %v4888
  %v4890 = vpop.f32.mrb[0].mxu0
  %4891 = vmatprep.mubr.f32.mxu0 0.0
  %4892 = vmatmul.mubr.f32.gmra.mrb[0].mxu0 %v2131
  %v4893 = vpop.f32.mrb[0].mxu0
  %v4894 = vadd.f32 %v576, %v4893
  %v4895 = vpop.f32.mrb[0].mxu0
  %4896 = vmatprep.mubr.f32.mxu0 0.0
  %4897 = vmatmul.mubr.f32.gmra.mrb[0].mxu0 %v2134
  %v4898 = vpop.f32.mrb[0].mxu0
  %v4899 = vadd.f32 %v576, %v4898
  %v4900 = vpop.f32.mrb[0].mxu0
  %4901 = vmatprep.mubr.f32.mxu0 0.0
  %4902 = vmatmul.mubr.f32.gmra.mrb[0].mxu0 %v2137
  %v4903 = vpop.f32.mrb[0].mxu0
  %v4904 = vadd.f32 %v576, %v4903
  %v4905 = vpop.f32.mrb[0].mxu0
  %4906 = vmatprep.mubr.f32.mxu0 0.0
  %4907 = vmatmul.mubr.f32.gmra.mrb[0].mxu0 %v2140
  %v4908 = vpop.f32.mrb[0].mxu0
  %v4909 = vadd.f32 %v576, %v4908
  %v4910 = vpop.f32.mrb[0].mxu0
  %4911 = vmatprep.mubr.f32.mxu0 0.0
  %4912 = vmatmul.mubr.f32.gmra.mrb[0].mxu0 %v2143
  %v4913 = vpop.f32.mrb[0].mxu0
  %v4914 = vadd.f32 %v576, %v4913
  %v4915 = vpop.f32.mrb[0].mxu0
  %4916 = vmatprep.mubr.f32.mxu0 0.0
  %4917 = vmatmul.mubr.f32.gmra.mrb[0].mxu0 %v2146
  %v4918 = vpop.f32.mrb[0].mxu0
  %v4919 = vadd.f32 %v576, %v4918
  %v4920 = vpop.f32.mrb[0].mxu0
  %4921 = vmatprep.mubr.f32.mxu0 0.0
  %4922 = vmatmul.mubr.f32.gmra.mrb[0].mxu0 %v2149
  %v4923 = vpop.f32.mrb[0].mxu0
  %v4924 = vadd.f32 %v576, %v4923
  %v4925 = vpop.f32.mrb[0].mxu0
  %4926 = vmatprep.mubr.f32.mxu0 0.0
  %4927 = vmatmul.mubr.f32.gmra.mrb[0].mxu0 %v2152
  %v4928 = vpop.f32.mrb[0].mxu0
  %v4929 = vadd.f32 %v576, %v4928
  %v4930 = vpop.f32.mrb[0].mxu0
  %4931 = vmatprep.mubr.f32.mxu0 0.0
  %4932 = vmatmul.mubr.f32.gmra.mrb[0].mxu0 %v2155
  %v4933 = vpop.f32.mrb[0].mxu0
  %v4934 = vadd.f32 %v576, %v4933
  %v4935 = vpop.f32.mrb[0].mxu0
  %4936 = vmatprep.mubr.f32.mxu0 0.0
  %4937 = vmatmul.mubr.f32.gmra.mrb[0].mxu0 %v2158
  %v4938 = vpop.f32.mrb[0].mxu0
  %v4939 = vadd.f32 %v576, %v4938
  %v4940 = vpop.f32.mrb[0].mxu0
  %4941 = vmatprep.mubr.f32.mxu0 0.0
  %4942 = vmatmul.mubr.f32.gmra.mrb[0].mxu0 %v2161
  %v4943 = vpop.f32.mrb[0].mxu0
  %v4944 = vadd.f32 %v576, %v4943
  %v4945 = vpop.f32.mrb[0].mxu0
  %4946 = vmatprep.mubr.f32.mxu0 0.0
  %4947 = vmatmul.mubr.f32.gmra.mrb[0].mxu0 %v2164
  %v4948 = vpop.f32.mrb[0].mxu0
  %v4949 = vadd.f32 %v576, %v4948
  %v4950 = vpop.f32.mrb[0].mxu0
  %4951 = vmatprep.mubr.f32.mxu0 0.0
  %4952 = vmatmul.mubr.f32.gmra.mrb[0].mxu0 %v2167
  %v4953 = vpop.f32.mrb[0].mxu0
  %v4954 = vadd.f32 %v576, %v4953
  %v4955 = vpop.f32.mrb[0].mxu0
  %4956 = vmatprep.mubr.f32.mxu0 0.0
  %4957 = vmatmul.mubr.f32.gmra.mrb[0].mxu0 %v2170
  %v4958 = vpop.f32.mrb[0].mxu0
  %v4959 = vadd.f32 %v576, %v4958
  %v4960 = vpop.f32.mrb[0].mxu0
  %4961 = vmatprep.mubr.f32.mxu0 0.0
  %4962 = vmatmul.mubr.f32.gmra.mrb[0].mxu0 %v2173
  %v4963 = vpop.f32.mrb[0].mxu0
  %v4964 = vadd.f32 %v576, %v4963
  %v4965 = vpop.f32.mrb[0].mxu0
  %4966 = vmatprep.mubr.f32.mxu0 0.0
  %4967 = vmatmul.mubr.f32.gmra.mrb[0].mxu0 %v2176
  %v4968 = vpop.f32.mrb[0].mxu0
  %v4969 = vadd.f32 %v576, %v4968
  %v4970 = vpop.f32.mrb[0].mxu0
  %4971 = vmatprep.mubr.f32.mxu0 0.0
  %4972 = vmatmul.mubr.f32.gmra.mrb[0].mxu0 %v2179
  %v4973 = vpop.f32.mrb[0].mxu0
  %v4974 = vadd.f32 %v576, %v4973
  %v4975 = vpop.f32.mrb[0].mxu0
  %4976 = vmatprep.mubr.f32.mxu0 0.0
  %4977 = vmatmul.mubr.f32.gmra.mrb[0].mxu0 %v2182
  %v4978 = vpop.f32.mrb[0].mxu0
  %v4979 = vadd.f32 %v576, %v4978
  %v4980 = vpop.f32.mrb[0].mxu0
  %4981 = vmatprep.mubr.f32.mxu0 0.0
  %4982 = vmatmul.mubr.f32.gmra.mrb[0].mxu0 %v2185
  %v4983 = vpop.f32.mrb[0].mxu0
  %v4984 = vadd.f32 %v576, %v4983
  %v4985 = vpop.f32.mrb[0].mxu0
  %4986 = vmatprep.mubr.f32.mxu0 0.0
  %4987 = vmatmul.mubr.f32.gmra.mrb[0].mxu0 %v2188
  %v4988 = vpop.f32.mrb[0].mxu0
  %v4989 = vadd.f32 %v576, %v4988
  %v4990 = vpop.f32.mrb[0].mxu0
  %4991 = vmatprep.mubr.f32.mxu0 0.0
  %4992 = vmatmul.mubr.f32.gmra.mrb[0].mxu0 %v2191
  %v4993 = vpop.f32.mrb[0].mxu0
  %v4994 = vadd.f32 %v576, %v4993
  %v4995 = vpop.f32.mrb[0].mxu0
  %4996 = vmatprep.mubr.f32.mxu0 0.0
  %4997 = vmatmul.mubr.f32.gmra.mrb[0].mxu0 %v2194
  %v4998 = vpop.f32.mrb[0].mxu0
  %v4999 = vadd.f32 %v576, %v4998
  %v5000 = vpop.f32.mrb[0].mxu0
  %5001 = vmatprep.mubr.f32.mxu0 0.0
  %5002 = vmatmul.mubr.f32.gmra.mrb[0].mxu0 %v2197
  %v5003 = vpop.f32.mrb[0].mxu0
  %v5004 = vadd.f32 %v576, %v5003
  %v5005 = vpop.f32.mrb[0].mxu0
  %5006 = vmatprep.mubr.f32.mxu0 0.0
  %5007 = vmatmul.mubr.f32.gmra.mrb[0].mxu0 %v2200
  %v5008 = vpop.f32.mrb[0].mxu0
  %v5009 = vadd.f32 %v576, %v5008
  %v5010 = vpop.f32.mrb[0].mxu0
  %5011 = vmatprep.mubr.f32.mxu0 0.0
  %5012 = vmatmul.mubr.f32.gmra.mrb[0].mxu0 %v2203
  %v5013 = vpop.f32.mrb[0].mxu0
  %v5014 = vadd.f32 %v576, %v5013
  %v5015 = vpop.f32.mrb[0].mxu0
  %5016 = vmatprep.mubr.f32.mxu0 0.0
  %5017 = vmatmul.mubr.f32.gmra.mrb[0].mxu0 %v2206
  %v5018 = vpop.f32.mrb[0].mxu0
  %v5019 = vadd.f32 %v576, %v5018
  %v5020 = vpop.f32.mrb[0].mxu0
  %5021 = vmatprep.mubr.f32.mxu0 0.0
  %5022 = vmatmul.mubr.f32.gmra.mrb[0].mxu0 %v2209
  %v5023 = vpop.f32.mrb[0].mxu0
  %v5024 = vadd.f32 %v576, %v5023
  %v5025 = vpop.f32.mrb[0].mxu0
  %5026 = vmatprep.mubr.f32.mxu0 0.0
  %5027 = vmatmul.mubr.f32.gmra.mrb[0].mxu0 %v2212
  %v5028 = vpop.f32.mrb[0].mxu0
  %v5029 = vadd.f32 %v576, %v5028
  %v5030 = vpop.f32.mrb[0].mxu0
  %5031 = vmatprep.mubr.f32.mxu0 0.0
  %5032 = vmatmul.mubr.f32.gmra.mrb[0].mxu0 %v2215
  %v5033 = vpop.f32.mrb[0].mxu0
  %v5034 = vadd.f32 %v576, %v5033
  %v5035 = vpop.f32.mrb[0].mxu0
  %5036 = vmatprep.mubr.f32.mxu0 0.0
  %5037 = vmatmul.mubr.f32.gmra.mrb[0].mxu0 %v2218
  %v5038 = vpop.f32.mrb[0].mxu0
  %v5039 = vadd.f32 %v576, %v5038
  %v5040 = vpop.f32.mrb[0].mxu0
  %5041 = vmatprep.mubr.f32.mxu0 0.0
  %5042 = vmatmul.mubr.f32.gmra.mrb[0].mxu0 %v2221
  %v5043 = vpop.f32.mrb[0].mxu0
  %v5044 = vadd.f32 %v576, %v5043
  %v5045 = vpop.f32.mrb[0].mxu0
  %5046 = vmatprep.mubr.f32.mxu0 0.0
  %5047 = vmatmul.mubr.f32.gmra.mrb[0].mxu0 %v2224
  %v5048 = vpop.f32.mrb[0].mxu0
  %v5049 = vadd.f32 %v576, %v5048
  %v5050 = vpop.f32.mrb[0].mxu0
  %5051 = vmatprep.mubr.f32.mxu0 0.0
  %5052 = vmatmul.mubr.f32.gmra.mrb[0].mxu0 %v2227
  %v5053 = vpop.f32.mrb[0].mxu0
  %v5054 = vadd.f32 %v576, %v5053
  %v5055 = vpop.f32.mrb[0].mxu0
  %5056 = vmatprep.mubr.f32.mxu0 0.0
  %5057 = vmatmul.mubr.f32.gmra.mrb[0].mxu0 %v2230
  %v5058 = vpop.f32.mrb[0].mxu0
  %v5059 = vadd.f32 %v576, %v5058
  %v5060 = vpop.f32.mrb[0].mxu0
  %5061 = vmatprep.mubr.f32.mxu0 0.0
  %5062 = vmatmul.mubr.f32.gmra.mrb[0].mxu0 %v2233
  %v5063 = vpop.f32.mrb[0].mxu0
  %v5064 = vadd.f32 %v576, %v5063
  %v5065 = vpop.f32.mrb[0].mxu0
  %5066 = vmatprep.mubr.f32.mxu0 0.0
  %5067 = vmatmul.mubr.f32.gmra.mrb[0].mxu0 %v2236
  %v5068 = vpop.f32.mrb[0].mxu0
  %v5069 = vadd.f32 %v576, %v5068
  %v5070 = vpop.f32.mrb[0].mxu0
  %5071 = vdwg.mxu0
  %v5072 = vmax.f32 %v2309, 0.0
  %v5073 = vmax.f32 %v2314, 0.0
  %v5074 = vmax.f32 %v2319, 0.0
  %v5075 = vmax.f32 %v2324, 0.0
  %v5076 = vmax.f32 %v2329, 0.0
  %v5077 = vmax.f32 %v2334, 0.0
  %v5078 = vmax.f32 %v2339, 0.0
  %v5079 = vmax.f32 %v2344, 0.0
  %v5080 = vmax.f32 %v2349, 0.0
  %v5081 = vmax.f32 %v2354, 0.0
  %v5082 = vmax.f32 %v2359, 0.0
  %v5083 = vmax.f32 %v2364, 0.0
  %v5084 = vmax.f32 %v2369, 0.0
  %v5085 = vmax.f32 %v2374, 0.0
  %v5086 = vmax.f32 %v2379, 0.0
  %v5087 = vmax.f32 %v2384, 0.0
  %v5088 = vmax.f32 %v2389, 0.0
  %v5089 = vmax.f32 %v2394, 0.0
  %v5090 = vmax.f32 %v2399, 0.0
  %v5091 = vmax.f32 %v2404, 0.0
  %v5092 = vmax.f32 %v2409, 0.0
  %v5093 = vmax.f32 %v2414, 0.0
  %v5094 = vmax.f32 %v2419, 0.0
  %v5095 = vmax.f32 %v2424, 0.0
  %v5096 = vmax.f32 %v2429, 0.0
  %v5097 = vmax.f32 %v2434, 0.0
  %v5098 = vmax.f32 %v2439, 0.0
  %v5099 = vmax.f32 %v2444, 0.0
  %v5100 = vmax.f32 %v2449, 0.0
  %v5101 = vmax.f32 %v2454, 0.0
  %v5102 = vmax.f32 %v2459, 0.0
  %v5103 = vmax.f32 %v2464, 0.0
  %v5104 = vmax.f32 %v2469, 0.0
  %v5105 = vmax.f32 %v2474, 0.0
  %v5106 = vmax.f32 %v2479, 0.0
  %v5107 = vmax.f32 %v2484, 0.0
  %v5108 = vmax.f32 %v2489, 0.0
  %v5109 = vmax.f32 %v2494, 0.0
  %v5110 = vmax.f32 %v2499, 0.0
  %v5111 = vmax.f32 %v2504, 0.0
  %v5112 = vmax.f32 %v2509, 0.0
  %v5113 = vmax.f32 %v2514, 0.0
  %v5114 = vmax.f32 %v2519, 0.0
  %v5115 = vmax.f32 %v2524, 0.0
  %v5116 = vmax.f32 %v2529, 0.0
  %v5117 = vmax.f32 %v2534, 0.0
  %v5118 = vmax.f32 %v2539, 0.0
  %v5119 = vmax.f32 %v2544, 0.0
  %v5120 = vmax.f32 %v2549, 0.0
  %v5121 = vmax.f32 %v2554, 0.0
  %v5122 = vmax.f32 %v2559, 0.0
  %v5123 = vmax.f32 %v2564, 0.0
  %v5124 = vmax.f32 %v2569, 0.0
  %v5125 = vmax.f32 %v2574, 0.0
  %v5126 = vmax.f32 %v2579, 0.0
  %v5127 = vmax.f32 %v2584, 0.0
  %v5128 = vmax.f32 %v2589, 0.0
  %v5129 = vmax.f32 %v2594, 0.0
  %v5130 = vmax.f32 %v2599, 0.0
  %v5131 = vmax.f32 %v2604, 0.0
  %v5132 = vmax.f32 %v2609, 0.0
  %v5133 = vmax.f32 %v2614, 0.0
  %v5134 = vmax.f32 %v2619, 0.0
  %v5135 = vmax.f32 %v2624, 0.0
  %v5136 = vmax.f32 %v2629, 0.0
  %v5137 = vmax.f32 %v2634, 0.0
  %v5138 = vmax.f32 %v2639, 0.0
  %v5139 = vmax.f32 %v2644, 0.0
  %v5140 = vmax.f32 %v2649, 0.0
  %v5141 = vmax.f32 %v2654, 0.0
  %v5142 = vmax.f32 %v2659, 0.0
  %v5143 = vmax.f32 %v2664, 0.0
  %v5144 = vmax.f32 %v2669, 0.0
  %v5145 = vmax.f32 %v2674, 0.0
  %v5146 = vmax.f32 %v2679, 0.0
  %v5147 = vmax.f32 %v2684, 0.0
  %v5148 = vmax.f32 %v2689, 0.0
  %v5149 = vmax.f32 %v2694, 0.0
  %v5150 = vmax.f32 %v2699, 0.0
  %v5151 = vmax.f32 %v2704, 0.0
  %v5152 = vmax.f32 %v2709, 0.0
  %v5153 = vmax.f32 %v2714, 0.0
  %v5154 = vmax.f32 %v2719, 0.0
  %v5155 = vmax.f32 %v2724, 0.0
  %v5156 = vmax.f32 %v2729, 0.0
  %v5157 = vmax.f32 %v2734, 0.0
  %v5158 = vmax.f32 %v2739, 0.0
  %v5159 = vmax.f32 %v2744, 0.0
  %v5160 = vmax.f32 %v2749, 0.0
  %v5161 = vmax.f32 %v2754, 0.0
  %v5162 = vmax.f32 %v2759, 0.0
  %v5163 = vmax.f32 %v2764, 0.0
  %v5164 = vmax.f32 %v2769, 0.0
  %v5165 = vmax.f32 %v2774, 0.0
  %v5166 = vmax.f32 %v2779, 0.0
  %v5167 = vmax.f32 %v2784, 0.0
  %v5168 = vmax.f32 %v2789, 0.0
  %v5169 = vmax.f32 %v2794, 0.0
  %v5170 = vmax.f32 %v2799, 0.0
  %v5171 = vmax.f32 %v2804, 0.0
  %v5172 = vmax.f32 %v2809, 0.0
  %v5173 = vmax.f32 %v2814, 0.0
  %v5174 = vmax.f32 %v2819, 0.0
  %v5175 = vmax.f32 %v2824, 0.0
  %v5176 = vmax.f32 %v2829, 0.0
  %v5177 = vmax.f32 %v2834, 0.0
  %v5178 = vmax.f32 %v2839, 0.0
  %v5179 = vmax.f32 %v2844, 0.0
  %v5180 = vmax.f32 %v2849, 0.0
  %v5181 = vmax.f32 %v2854, 0.0
  %v5182 = vmax.f32 %v2859, 0.0
  %v5183 = vmax.f32 %v2864, 0.0
  %v5184 = vmax.f32 %v2869, 0.0
  %v5185 = vmax.f32 %v2874, 0.0
  %v5186 = vmax.f32 %v2879, 0.0
  %v5187 = vmax.f32 %v2884, 0.0
  %v5188 = vmax.f32 %v2889, 0.0
  %v5189 = vmax.f32 %v2894, 0.0
  %v5190 = vmax.f32 %v2899, 0.0
  %v5191 = vmax.f32 %v2904, 0.0
  %v5192 = vmax.f32 %v2909, 0.0
  %v5193 = vmax.f32 %v2914, 0.0
  %v5194 = vmax.f32 %v2919, 0.0
  %v5195 = vmax.f32 %v2924, 0.0
  %v5196 = vmax.f32 %v2929, 0.0
  %v5197 = vmax.f32 %v2934, 0.0
  %v5198 = vmax.f32 %v2939, 0.0
  %v5199 = vmax.f32 %v2944, 0.0
  %v5200 = vmax.f32 %v2949, 0.0
  %v5201 = vmax.f32 %v2954, 0.0
  %v5202 = vmax.f32 %v2959, 0.0
  %v5203 = vmax.f32 %v2964, 0.0
  %v5204 = vmax.f32 %v2969, 0.0
  %v5205 = vmax.f32 %v2974, 0.0
  %v5206 = vmax.f32 %v2979, 0.0
  %v5207 = vmax.f32 %v2984, 0.0
  %v5208 = vmax.f32 %v2989, 0.0
  %v5209 = vmax.f32 %v2994, 0.0
  %v5210 = vmax.f32 %v2999, 0.0
  %v5211 = vmax.f32 %v3004, 0.0
  %v5212 = vmax.f32 %v3009, 0.0
  %v5213 = vmax.f32 %v3014, 0.0
  %v5214 = vmax.f32 %v3019, 0.0
  %v5215 = vmax.f32 %v3024, 0.0
  %v5216 = vmax.f32 %v3029, 0.0
  %v5217 = vmax.f32 %v3034, 0.0
  %v5218 = vmax.f32 %v3039, 0.0
  %v5219 = vmax.f32 %v3044, 0.0
  %v5220 = vmax.f32 %v3049, 0.0
  %v5221 = vmax.f32 %v3054, 0.0
  %v5222 = vmax.f32 %v3059, 0.0
  %v5223 = vmax.f32 %v3064, 0.0
  %v5224 = vmax.f32 %v3069, 0.0
  %v5225 = vmax.f32 %v3074, 0.0
  %v5226 = vmax.f32 %v3079, 0.0
  %v5227 = vmax.f32 %v3084, 0.0
  %v5228 = vmax.f32 %v3089, 0.0
  %v5229 = vmax.f32 %v3094, 0.0
  %v5230 = vmax.f32 %v3099, 0.0
  %v5231 = vmax.f32 %v3104, 0.0
  %v5232 = vmax.f32 %v3109, 0.0
  %v5233 = vmax.f32 %v3114, 0.0
  %v5234 = vmax.f32 %v3119, 0.0
  %v5235 = vmax.f32 %v3124, 0.0
  %v5236 = vmax.f32 %v3129, 0.0
  %v5237 = vmax.f32 %v3134, 0.0
  %v5238 = vmax.f32 %v3139, 0.0
  %v5239 = vmax.f32 %v3144, 0.0
  %v5240 = vmax.f32 %v3149, 0.0
  %v5241 = vmax.f32 %v3154, 0.0
  %v5242 = vmax.f32 %v3159, 0.0
  %v5243 = vmax.f32 %v3164, 0.0
  %v5244 = vmax.f32 %v3169, 0.0
  %v5245 = vmax.f32 %v3174, 0.0
  %v5246 = vmax.f32 %v3179, 0.0
  %v5247 = vmax.f32 %v3184, 0.0
  %v5248 = vmax.f32 %v3189, 0.0
  %v5249 = vmax.f32 %v3194, 0.0
  %v5250 = vmax.f32 %v3199, 0.0
  %v5251 = vmax.f32 %v3204, 0.0
  %v5252 = vmax.f32 %v3209, 0.0
  %v5253 = vmax.f32 %v3214, 0.0
  %v5254 = vmax.f32 %v3219, 0.0
  %v5255 = vmax.f32 %v3224, 0.0
  %v5256 = vmax.f32 %v3229, 0.0
  %v5257 = vmax.f32 %v3234, 0.0
  %v5258 = vmax.f32 %v3239, 0.0
  %v5259 = vmax.f32 %v3244, 0.0
  %v5260 = vmax.f32 %v3249, 0.0
  %v5261 = vmax.f32 %v3254, 0.0
  %v5262 = vmax.f32 %v3259, 0.0
  %v5263 = vmax.f32 %v3264, 0.0
  %v5264 = vmax.f32 %v3269, 0.0
  %v5265 = vmax.f32 %v3274, 0.0
  %v5266 = vmax.f32 %v3279, 0.0
  %v5267 = vmax.f32 %v3284, 0.0
  %v5268 = vmax.f32 %v3289, 0.0
  %v5269 = vmax.f32 %v3294, 0.0
  %v5270 = vmax.f32 %v3299, 0.0
  %v5271 = vmax.f32 %v3304, 0.0
  %v5272 = vmax.f32 %v3309, 0.0
  %v5273 = vmax.f32 %v3314, 0.0
  %v5274 = vmax.f32 %v3319, 0.0
  %v5275 = vmax.f32 %v3324, 0.0
  %v5276 = vmax.f32 %v3329, 0.0
  %v5277 = vmax.f32 %v3334, 0.0
  %v5278 = vmax.f32 %v3339, 0.0
  %v5279 = vmax.f32 %v3344, 0.0
  %v5280 = vmax.f32 %v3349, 0.0
  %v5281 = vmax.f32 %v3354, 0.0
  %v5282 = vmax.f32 %v3359, 0.0
  %v5283 = vmax.f32 %v3364, 0.0
  %v5284 = vmax.f32 %v3369, 0.0
  %v5285 = vmax.f32 %v3374, 0.0
  %v5286 = vmax.f32 %v3379, 0.0
  %v5287 = vmax.f32 %v3384, 0.0
  %v5288 = vmax.f32 %v3389, 0.0
  %v5289 = vmax.f32 %v3394, 0.0
  %v5290 = vmax.f32 %v3399, 0.0
  %v5291 = vmax.f32 %v3404, 0.0
  %v5292 = vmax.f32 %v3409, 0.0
  %v5293 = vmax.f32 %v3414, 0.0
  %v5294 = vmax.f32 %v3419, 0.0
  %v5295 = vmax.f32 %v3424, 0.0
  %v5296 = vmax.f32 %v3429, 0.0
  %v5297 = vmax.f32 %v3434, 0.0
  %v5298 = vmax.f32 %v3439, 0.0
  %v5299 = vmax.f32 %v3444, 0.0
  %v5300 = vmax.f32 %v3449, 0.0
  %v5301 = vmax.f32 %v3454, 0.0
  %v5302 = vmax.f32 %v3459, 0.0
  %v5303 = vmax.f32 %v3464, 0.0
  %v5304 = vmax.f32 %v3469, 0.0
  %v5305 = vmax.f32 %v3474, 0.0
  %v5306 = vmax.f32 %v3479, 0.0
  %v5307 = vmax.f32 %v3484, 0.0
  %v5308 = vmax.f32 %v3489, 0.0
  %v5309 = vmax.f32 %v3494, 0.0
  %v5310 = vmax.f32 %v3499, 0.0
  %v5311 = vmax.f32 %v3504, 0.0
  %v5312 = vmax.f32 %v3509, 0.0
  %v5313 = vmax.f32 %v3514, 0.0
  %v5314 = vmax.f32 %v3519, 0.0
  %v5315 = vmax.f32 %v3524, 0.0
  %v5316 = vmax.f32 %v3529, 0.0
  %v5317 = vmax.f32 %v3534, 0.0
  %v5318 = vmax.f32 %v3539, 0.0
  %v5319 = vmax.f32 %v3544, 0.0
  %v5320 = vmax.f32 %v3549, 0.0
  %v5321 = vmax.f32 %v3554, 0.0
  %v5322 = vmax.f32 %v3559, 0.0
  %v5323 = vmax.f32 %v3564, 0.0
  %v5324 = vmax.f32 %v3569, 0.0
  %v5325 = vmax.f32 %v3574, 0.0
  %v5326 = vmax.f32 %v3579, 0.0
  %v5327 = vmax.f32 %v3584, 0.0
  %v5328 = vmax.f32 %v3589, 0.0
  %v5329 = vmax.f32 %v3594, 0.0
  %v5330 = vmax.f32 %v3599, 0.0
  %v5331 = vmax.f32 %v3604, 0.0
  %v5332 = vmax.f32 %v3609, 0.0
  %v5333 = vmax.f32 %v3614, 0.0
  %v5334 = vmax.f32 %v3619, 0.0
  %v5335 = vmax.f32 %v3624, 0.0
  %v5336 = vmax.f32 %v3629, 0.0
  %v5337 = vmax.f32 %v3634, 0.0
  %v5338 = vmax.f32 %v3639, 0.0
  %v5339 = vmax.f32 %v3644, 0.0
  %v5340 = vmax.f32 %v3649, 0.0
  %v5341 = vmax.f32 %v3654, 0.0
  %v5342 = vmax.f32 %v3659, 0.0
  %v5343 = vmax.f32 %v3664, 0.0
  %v5344 = vmax.f32 %v3669, 0.0
  %v5345 = vmax.f32 %v3674, 0.0
  %v5346 = vmax.f32 %v3679, 0.0
  %v5347 = vmax.f32 %v3684, 0.0
  %v5348 = vmax.f32 %v3689, 0.0
  %v5349 = vmax.f32 %v3694, 0.0
  %v5350 = vmax.f32 %v3699, 0.0
  %v5351 = vmax.f32 %v3704, 0.0
  %v5352 = vmax.f32 %v3709, 0.0
  %v5353 = vmax.f32 %v3714, 0.0
  %v5354 = vmax.f32 %v3719, 0.0
  %v5355 = vmax.f32 %v3724, 0.0
  %v5356 = vmax.f32 %v3729, 0.0
  %v5357 = vmax.f32 %v3734, 0.0
  %v5358 = vmax.f32 %v3739, 0.0
  %v5359 = vmax.f32 %v3744, 0.0
  %v5360 = vmax.f32 %v3749, 0.0
  %v5361 = vmax.f32 %v3754, 0.0
  %v5362 = vmax.f32 %v3759, 0.0
  %v5363 = vmax.f32 %v3764, 0.0
  %v5364 = vmax.f32 %v3769, 0.0
  %v5365 = vmax.f32 %v3774, 0.0
  %v5366 = vmax.f32 %v3779, 0.0
  %v5367 = vmax.f32 %v3784, 0.0
  %v5368 = vmax.f32 %v3789, 0.0
  %v5369 = vmax.f32 %v3794, 0.0
  %v5370 = vmax.f32 %v3799, 0.0
  %v5371 = vmax.f32 %v3804, 0.0
  %v5372 = vmax.f32 %v3809, 0.0
  %v5373 = vmax.f32 %v3814, 0.0
  %v5374 = vmax.f32 %v3819, 0.0
  %v5375 = vmax.f32 %v3824, 0.0
  %v5376 = vmax.f32 %v3829, 0.0
  %v5377 = vmax.f32 %v3834, 0.0
  %v5378 = vmax.f32 %v3839, 0.0
  %v5379 = vmax.f32 %v3844, 0.0
  %v5380 = vmax.f32 %v3849, 0.0
  %v5381 = vmax.f32 %v3854, 0.0
  %v5382 = vmax.f32 %v3859, 0.0
  %v5383 = vmax.f32 %v3864, 0.0
  %v5384 = vmax.f32 %v3869, 0.0
  %v5385 = vmax.f32 %v3874, 0.0
  %v5386 = vmax.f32 %v3879, 0.0
  %v5387 = vmax.f32 %v3884, 0.0
  %v5388 = vmax.f32 %v3889, 0.0
  %v5389 = vmax.f32 %v3894, 0.0
  %v5390 = vmax.f32 %v3899, 0.0
  %v5391 = vmax.f32 %v3904, 0.0
  %v5392 = vmax.f32 %v3909, 0.0
  %v5393 = vmax.f32 %v3914, 0.0
  %v5394 = vmax.f32 %v3919, 0.0
  %v5395 = vmax.f32 %v3924, 0.0
  %v5396 = vmax.f32 %v3929, 0.0
  %v5397 = vmax.f32 %v3934, 0.0
  %v5398 = vmax.f32 %v3939, 0.0
  %v5399 = vmax.f32 %v3944, 0.0
  %v5400 = vmax.f32 %v3949, 0.0
  %v5401 = vmax.f32 %v3954, 0.0
  %v5402 = vmax.f32 %v3959, 0.0
  %v5403 = vmax.f32 %v3964, 0.0
  %v5404 = vmax.f32 %v3969, 0.0
  %v5405 = vmax.f32 %v3974, 0.0
  %v5406 = vmax.f32 %v3979, 0.0
  %v5407 = vmax.f32 %v3984, 0.0
  %v5408 = vmax.f32 %v3989, 0.0
  %v5409 = vmax.f32 %v3994, 0.0
  %v5410 = vmax.f32 %v3999, 0.0
  %v5411 = vmax.f32 %v4004, 0.0
  %v5412 = vmax.f32 %v4009, 0.0
  %v5413 = vmax.f32 %v4014, 0.0
  %v5414 = vmax.f32 %v4019, 0.0
  %v5415 = vmax.f32 %v4024, 0.0
  %v5416 = vmax.f32 %v4029, 0.0
  %v5417 = vmax.f32 %v4034, 0.0
  %v5418 = vmax.f32 %v4039, 0.0
  %v5419 = vmax.f32 %v4044, 0.0
  %v5420 = vmax.f32 %v4049, 0.0
  %v5421 = vmax.f32 %v4054, 0.0
  %v5422 = vmax.f32 %v4059, 0.0
  %v5423 = vmax.f32 %v4064, 0.0
  %v5424 = vmax.f32 %v4069, 0.0
  %v5425 = vmax.f32 %v4074, 0.0
  %v5426 = vmax.f32 %v4079, 0.0
  %v5427 = vmax.f32 %v4084, 0.0
  %v5428 = vmax.f32 %v4089, 0.0
  %v5429 = vmax.f32 %v4094, 0.0
  %v5430 = vmax.f32 %v4099, 0.0
  %v5431 = vmax.f32 %v4104, 0.0
  %v5432 = vmax.f32 %v4109, 0.0
  %v5433 = vmax.f32 %v4114, 0.0
  %v5434 = vmax.f32 %v4119, 0.0
  %v5435 = vmax.f32 %v4124, 0.0
  %v5436 = vmax.f32 %v4129, 0.0
  %v5437 = vmax.f32 %v4134, 0.0
  %v5438 = vmax.f32 %v4139, 0.0
  %v5439 = vmax.f32 %v4144, 0.0
  %v5440 = vmax.f32 %v4149, 0.0
  %v5441 = vmax.f32 %v4154, 0.0
  %v5442 = vmax.f32 %v4159, 0.0
  %v5443 = vmax.f32 %v4164, 0.0
  %v5444 = vmax.f32 %v4169, 0.0
  %v5445 = vmax.f32 %v4174, 0.0
  %v5446 = vmax.f32 %v4179, 0.0
  %v5447 = vmax.f32 %v4184, 0.0
  %v5448 = vmax.f32 %v4189, 0.0
  %v5449 = vmax.f32 %v4194, 0.0
  %v5450 = vmax.f32 %v4199, 0.0
  %v5451 = vmax.f32 %v4204, 0.0
  %v5452 = vmax.f32 %v4209, 0.0
  %v5453 = vmax.f32 %v4214, 0.0
  %v5454 = vmax.f32 %v4219, 0.0
  %v5455 = vmax.f32 %v4224, 0.0
  %v5456 = vmax.f32 %v4229, 0.0
  %v5457 = vmax.f32 %v4234, 0.0
  %v5458 = vmax.f32 %v4239, 0.0
  %v5459 = vmax.f32 %v4244, 0.0
  %v5460 = vmax.f32 %v4249, 0.0
  %v5461 = vmax.f32 %v4254, 0.0
  %v5462 = vmax.f32 %v4259, 0.0
  %v5463 = vmax.f32 %v4264, 0.0
  %v5464 = vmax.f32 %v4269, 0.0
  %v5465 = vmax.f32 %v4274, 0.0
  %v5466 = vmax.f32 %v4279, 0.0
  %v5467 = vmax.f32 %v4284, 0.0
  %v5468 = vmax.f32 %v4289, 0.0
  %v5469 = vmax.f32 %v4294, 0.0
  %v5470 = vmax.f32 %v4299, 0.0
  %v5471 = vmax.f32 %v4304, 0.0
  %v5472 = vmax.f32 %v4309, 0.0
  %v5473 = vmax.f32 %v4314, 0.0
  %v5474 = vmax.f32 %v4319, 0.0
  %v5475 = vmax.f32 %v4324, 0.0
  %v5476 = vmax.f32 %v4329, 0.0
  %v5477 = vmax.f32 %v4334, 0.0
  %v5478 = vmax.f32 %v4339, 0.0
  %v5479 = vmax.f32 %v4344, 0.0
  %v5480 = vmax.f32 %v4349, 0.0
  %v5481 = vmax.f32 %v4354, 0.0
  %v5482 = vmax.f32 %v4359, 0.0
  %v5483 = vmax.f32 %v4364, 0.0
  %v5484 = vmax.f32 %v4369, 0.0
  %v5485 = vmax.f32 %v4374, 0.0
  %v5486 = vmax.f32 %v4379, 0.0
  %v5487 = vmax.f32 %v4384, 0.0
  %v5488 = vmax.f32 %v4389, 0.0
  %v5489 = vmax.f32 %v4394, 0.0
  %v5490 = vmax.f32 %v4399, 0.0
  %v5491 = vmax.f32 %v4404, 0.0
  %v5492 = vmax.f32 %v4409, 0.0
  %v5493 = vmax.f32 %v4414, 0.0
  %v5494 = vmax.f32 %v4419, 0.0
  %v5495 = vmax.f32 %v4424, 0.0
  %v5496 = vmax.f32 %v4429, 0.0
  %v5497 = vmax.f32 %v4434, 0.0
  %v5498 = vmax.f32 %v4439, 0.0
  %v5499 = vmax.f32 %v4444, 0.0
  %v5500 = vmax.f32 %v4449, 0.0
  %v5501 = vmax.f32 %v4454, 0.0
  %v5502 = vmax.f32 %v4459, 0.0
  %v5503 = vmax.f32 %v4464, 0.0
  %v5504 = vmax.f32 %v4469, 0.0
  %v5505 = vmax.f32 %v4474, 0.0
  %v5506 = vmax.f32 %v4479, 0.0
  %v5507 = vmax.f32 %v4484, 0.0
  %v5508 = vmax.f32 %v4489, 0.0
  %v5509 = vmax.f32 %v4494, 0.0
  %v5510 = vmax.f32 %v4499, 0.0
  %v5511 = vmax.f32 %v4504, 0.0
  %v5512 = vmax.f32 %v4509, 0.0
  %v5513 = vmax.f32 %v4514, 0.0
  %v5514 = vmax.f32 %v4519, 0.0
  %v5515 = vmax.f32 %v4524, 0.0
  %v5516 = vmax.f32 %v4529, 0.0
  %v5517 = vmax.f32 %v4534, 0.0
  %v5518 = vmax.f32 %v4539, 0.0
  %v5519 = vmax.f32 %v4544, 0.0
  %v5520 = vmax.f32 %v4549, 0.0
  %v5521 = vmax.f32 %v4554, 0.0
  %v5522 = vmax.f32 %v4559, 0.0
  %v5523 = vmax.f32 %v4564, 0.0
  %v5524 = vmax.f32 %v4569, 0.0
  %v5525 = vmax.f32 %v4574, 0.0
  %v5526 = vmax.f32 %v4579, 0.0
  %v5527 = vmax.f32 %v4584, 0.0
  %v5528 = vmax.f32 %v4589, 0.0
  %v5529 = vmax.f32 %v4594, 0.0
  %v5530 = vmax.f32 %v4599, 0.0
  %v5531 = vmax.f32 %v4604, 0.0
  %v5532 = vmax.f32 %v4609, 0.0
  %v5533 = vmax.f32 %v4614, 0.0
  %v5534 = vmax.f32 %v4619, 0.0
  %v5535 = vmax.f32 %v4624, 0.0
  %v5536 = vmax.f32 %v4629, 0.0
  %v5537 = vmax.f32 %v4634, 0.0
  %v5538 = vmax.f32 %v4639, 0.0
  %v5539 = vmax.f32 %v4644, 0.0
  %v5540 = vmax.f32 %v4649, 0.0
  %v5541 = vmax.f32 %v4654, 0.0
  %v5542 = vmax.f32 %v4659, 0.0
  %v5543 = vmax.f32 %v4664, 0.0
  %v5544 = vmax.f32 %v4669, 0.0
  %v5545 = vmax.f32 %v4674, 0.0
  %v5546 = vmax.f32 %v4679, 0.0
  %v5547 = vmax.f32 %v4684, 0.0
  %v5548 = vmax.f32 %v4689, 0.0
  %v5549 = vmax.f32 %v4694, 0.0
  %v5550 = vmax.f32 %v4699, 0.0
  %v5551 = vmax.f32 %v4704, 0.0
  %v5552 = vmax.f32 %v4709, 0.0
  %v5553 = vmax.f32 %v4714, 0.0
  %v5554 = vmax.f32 %v4719, 0.0
  %v5555 = vmax.f32 %v4724, 0.0
  %v5556 = vmax.f32 %v4729, 0.0
  %v5557 = vmax.f32 %v4734, 0.0
  %v5558 = vmax.f32 %v4739, 0.0
  %v5559 = vmax.f32 %v4744, 0.0
  %v5560 = vmax.f32 %v4749, 0.0
  %v5561 = vmax.f32 %v4754, 0.0
  %v5562 = vmax.f32 %v4759, 0.0
  %v5563 = vmax.f32 %v4764, 0.0
  %v5564 = vmax.f32 %v4769, 0.0
  %v5565 = vmax.f32 %v4774, 0.0
  %v5566 = vmax.f32 %v4779, 0.0
  %v5567 = vmax.f32 %v4784, 0.0
  %v5568 = vmax.f32 %v4789, 0.0
  %v5569 = vmax.f32 %v4794, 0.0
  %v5570 = vmax.f32 %v4799, 0.0
  %v5571 = vmax.f32 %v4804, 0.0
  %v5572 = vmax.f32 %v4809, 0.0
  %v5573 = vmax.f32 %v4814, 0.0
  %v5574 = vmax.f32 %v4819, 0.0
  %v5575 = vmax.f32 %v4824, 0.0
  %v5576 = vmax.f32 %v4829, 0.0
  %v5577 = vmax.f32 %v4834, 0.0
  %v5578 = vmax.f32 %v4839, 0.0
  %v5579 = vmax.f32 %v4844, 0.0
  %v5580 = vmax.f32 %v4849, 0.0
  %v5581 = vmax.f32 %v4854, 0.0
  %v5582 = vmax.f32 %v4859, 0.0
  %v5583 = vmax.f32 %v4864, 0.0
  %v5584 = vmax.f32 %v4869, 0.0
  %v5585 = vmax.f32 %v4874, 0.0
  %v5586 = vmax.f32 %v4879, 0.0
  %v5587 = vmax.f32 %v4884, 0.0
  %v5588 = vmax.f32 %v4889, 0.0
  %v5589 = vmax.f32 %v4894, 0.0
  %v5590 = vmax.f32 %v4899, 0.0
  %v5591 = vmax.f32 %v4904, 0.0
  %v5592 = vmax.f32 %v4909, 0.0
  %v5593 = vmax.f32 %v4914, 0.0
  %v5594 = vmax.f32 %v4919, 0.0
  %v5595 = vmax.f32 %v4924, 0.0
  %v5596 = vmax.f32 %v4929, 0.0
  %v5597 = vmax.f32 %v4934, 0.0
  %v5598 = vmax.f32 %v4939, 0.0
  %v5599 = vmax.f32 %v4944, 0.0
  %v5600 = vmax.f32 %v4949, 0.0
  %v5601 = vmax.f32 %v4954, 0.0
  %v5602 = vmax.f32 %v4959, 0.0
  %v5603 = vmax.f32 %v4964, 0.0
  %v5604 = vmax.f32 %v4969, 0.0
  %v5605 = vmax.f32 %v4974, 0.0
  %v5606 = vmax.f32 %v4979, 0.0
  %v5607 = vmax.f32 %v4984, 0.0
  %v5608 = vmax.f32 %v4989, 0.0
  %v5609 = vmax.f32 %v4994, 0.0
  %v5610 = vmax.f32 %v4999, 0.0
  %v5611 = vmax.f32 %v5004, 0.0
  %v5612 = vmax.f32 %v5009, 0.0
  %v5613 = vmax.f32 %v5014, 0.0
  %v5614 = vmax.f32 %v5019, 0.0
  %v5615 = vmax.f32 %v5024, 0.0
  %v5616 = vmax.f32 %v5029, 0.0
  %v5617 = vmax.f32 %v5034, 0.0
  %v5618 = vmax.f32 %v5039, 0.0
  %v5619 = vmax.f32 %v5044, 0.0
  %v5620 = vmax.f32 %v5049, 0.0
  %v5621 = vmax.f32 %v5054, 0.0
  %v5622 = vmax.f32 %v5059, 0.0
  %v5623 = vmax.f32 %v5064, 0.0
  %v5624 = vmax.f32 %v5069, 0.0
  %vm5625 = vcmask 523264
  %5626 = vst.msk [vmem:[%s3] sm:$0xff] %vm5625, %v5072
  %5627 = vst.msk [vmem:[%s3 + $0x8] sm:$0xff] %vm5625, %v5073
  %5628 = vst.msk [vmem:[%s3 + $0x10] sm:$0xff] %vm5625, %v5074
  %5629 = vst.msk [vmem:[%s3 + $0x18] sm:$0xff] %vm5625, %v5075
  %5630 = vst.msk [vmem:[%s3 + $0x20] sm:$0xff] %vm5625, %v5076
  %5631 = vst.msk [vmem:[%s3 + $0x28] sm:$0xff] %vm5625, %v5077
  %5632 = vst.msk [vmem:[%s3 + $0x30] sm:$0xff] %vm5625, %v5078
  %5633 = vst.msk [vmem:[%s3 + $0x38] sm:$0xff] %vm5625, %v5079
  %5634 = vst.msk [vmem:[%s3 + $0x40] sm:$0xff] %vm5625, %v5080
  %5635 = vst.msk [vmem:[%s3 + $0x48] sm:$0xff] %vm5625, %v5081
  %5636 = vst.msk [vmem:[%s3 + $0x50] sm:$0xff] %vm5625, %v5082
  %5637 = vst.msk [vmem:[%s3 + $0x58] sm:$0xff] %vm5625, %v5083
  %5638 = vst.msk [vmem:[%s3 + $0x60] sm:$0xff] %vm5625, %v5084
  %5639 = vst.msk [vmem:[%s3 + $0x68] sm:$0xff] %vm5625, %v5085
  %5640 = vst.msk [vmem:[%s3 + $0x70] sm:$0xff] %vm5625, %v5086
  %5641 = vst.msk [vmem:[%s3 + $0x78] sm:$0xff] %vm5625, %v5087
  %5642 = vst.msk [vmem:[%s3 + $0x80] sm:$0xff] %vm5625, %v5088
  %5643 = vst.msk [vmem:[%s3 + $0x88] sm:$0xff] %vm5625, %v5089
  %5644 = vst.msk [vmem:[%s3 + $0x90] sm:$0xff] %vm5625, %v5090
  %5645 = vst.msk [vmem:[%s3 + $0x98] sm:$0xff] %vm5625, %v5091
  %5646 = vst.msk [vmem:[%s3 + $0xa0] sm:$0xff] %vm5625, %v5092
  %5647 = vst.msk [vmem:[%s3 + $0xa8] sm:$0xff] %vm5625, %v5093
  %5648 = vst.msk [vmem:[%s3 + $0xb0] sm:$0xff] %vm5625, %v5094
  %5649 = vst.msk [vmem:[%s3 + $0xb8] sm:$0xff] %vm5625, %v5095
  %5650 = vst.msk [vmem:[%s3 + $0xc0] sm:$0xff] %vm5625, %v5096
  %5651 = vst.msk [vmem:[%s3 + $0xc8] sm:$0xff] %vm5625, %v5097
  %5652 = vst.msk [vmem:[%s3 + $0xd0] sm:$0xff] %vm5625, %v5098
  %5653 = vst.msk [vmem:[%s3 + $0xd8] sm:$0xff] %vm5625, %v5099
  %5654 = vst.msk [vmem:[%s3 + $0xe0] sm:$0xff] %vm5625, %v5100
  %5655 = vst.msk [vmem:[%s3 + $0xe8] sm:$0xff] %vm5625, %v5101
  %5656 = vst.msk [vmem:[%s3 + $0xf0] sm:$0xff] %vm5625, %v5102
  %5657 = vst.msk [vmem:[%s3 + $0xf8] sm:$0xff] %vm5625, %v5103
  %5658 = vst.msk [vmem:[%s3 + $0x100] sm:$0xff] %vm5625, %v5104
  %5659 = vst.msk [vmem:[%s3 + $0x108] sm:$0xff] %vm5625, %v5105
  %5660 = vst.msk [vmem:[%s3 + $0x110] sm:$0xff] %vm5625, %v5106
  %5661 = vst.msk [vmem:[%s3 + $0x118] sm:$0xff] %vm5625, %v5107
  %5662 = vst.msk [vmem:[%s3 + $0x120] sm:$0xff] %vm5625, %v5108
  %5663 = vst.msk [vmem:[%s3 + $0x128] sm:$0xff] %vm5625, %v5109
  %5664 = vst.msk [vmem:[%s3 + $0x130] sm:$0xff] %vm5625, %v5110
  %5665 = vst.msk [vmem:[%s3 + $0x138] sm:$0xff] %vm5625, %v5111
  %5666 = vst.msk [vmem:[%s3 + $0x140] sm:$0xff] %vm5625, %v5112
  %5667 = vst.msk [vmem:[%s3 + $0x148] sm:$0xff] %vm5625, %v5113
  %5668 = vst.msk [vmem:[%s3 + $0x150] sm:$0xff] %vm5625, %v5114
  %5669 = vst.msk [vmem:[%s3 + $0x158] sm:$0xff] %vm5625, %v5115
  %5670 = vst.msk [vmem:[%s3 + $0x160] sm:$0xff] %vm5625, %v5116
  %5671 = vst.msk [vmem:[%s3 + $0x168] sm:$0xff] %vm5625, %v5117
  %5672 = vst.msk [vmem:[%s3 + $0x170] sm:$0xff] %vm5625, %v5118
  %5673 = vst.msk [vmem:[%s3 + $0x178] sm:$0xff] %vm5625, %v5119
  %5674 = vst.msk [vmem:[%s3 + $0x180] sm:$0xff] %vm5625, %v5120
  %5675 = vst.msk [vmem:[%s3 + $0x188] sm:$0xff] %vm5625, %v5121
  %5676 = vst.msk [vmem:[%s3 + $0x190] sm:$0xff] %vm5625, %v5122
  %5677 = vst.msk [vmem:[%s3 + $0x198] sm:$0xff] %vm5625, %v5123
  %5678 = vst.msk [vmem:[%s3 + $0x1a0] sm:$0xff] %vm5625, %v5124
  %5679 = vst.msk [vmem:[%s3 + $0x1a8] sm:$0xff] %vm5625, %v5125
  %5680 = vst.msk [vmem:[%s3 + $0x1b0] sm:$0xff] %vm5625, %v5126
  %5681 = vst.msk [vmem:[%s3 + $0x1b8] sm:$0xff] %vm5625, %v5127
  %5682 = vst.msk [vmem:[%s3 + $0x1c0] sm:$0xff] %vm5625, %v5128
  %5683 = vst.msk [vmem:[%s3 + $0x1c8] sm:$0xff] %vm5625, %v5129
  %5684 = vst.msk [vmem:[%s3 + $0x1d0] sm:$0xff] %vm5625, %v5130
  %5685 = vst.msk [vmem:[%s3 + $0x1d8] sm:$0xff] %vm5625, %v5131
  %5686 = vst.msk [vmem:[%s3 + $0x1e0] sm:$0xff] %vm5625, %v5132
  %5687 = vst.msk [vmem:[%s3 + $0x1e8] sm:$0xff] %vm5625, %v5133
  %5688 = vst.msk [vmem:[%s3 + $0x1f0] sm:$0xff] %vm5625, %v5134
  %5689 = vst.msk [vmem:[%s3 + $0x1f8] sm:$0xff] %vm5625, %v5135
  %5690 = vst.msk [vmem:[%s3 + $0x200] sm:$0xff] %vm5625, %v5136
  %5691 = vst.msk [vmem:[%s3 + $0x208] sm:$0xff] %vm5625, %v5137
  %5692 = vst.msk [vmem:[%s3 + $0x210] sm:$0xff] %vm5625, %v5138
  %5693 = vst.msk [vmem:[%s3 + $0x218] sm:$0xff] %vm5625, %v5139
  %5694 = vst.msk [vmem:[%s3 + $0x220] sm:$0xff] %vm5625, %v5140
  %5695 = vst.msk [vmem:[%s3 + $0x228] sm:$0xff] %vm5625, %v5141
  %5696 = vst.msk [vmem:[%s3 + $0x230] sm:$0xff] %vm5625, %v5142
  %5697 = vst.msk [vmem:[%s3 + $0x238] sm:$0xff] %vm5625, %v5143
  %5698 = vst.msk [vmem:[%s3 + $0x240] sm:$0xff] %vm5625, %v5144
  %5699 = vst.msk [vmem:[%s3 + $0x248] sm:$0xff] %vm5625, %v5145
  %5700 = vst.msk [vmem:[%s3 + $0x250] sm:$0xff] %vm5625, %v5146
  %5701 = vst.msk [vmem:[%s3 + $0x258] sm:$0xff] %vm5625, %v5147
  %5702 = vst.msk [vmem:[%s3 + $0x260] sm:$0xff] %vm5625, %v5148
  %5703 = vst.msk [vmem:[%s3 + $0x268] sm:$0xff] %vm5625, %v5149
  %5704 = vst.msk [vmem:[%s3 + $0x270] sm:$0xff] %vm5625, %v5150
  %5705 = vst.msk [vmem:[%s3 + $0x278] sm:$0xff] %vm5625, %v5151
  %5706 = vst.msk [vmem:[%s3 + $0x280] sm:$0xff] %vm5625, %v5152
  %5707 = vst.msk [vmem:[%s3 + $0x288] sm:$0xff] %vm5625, %v5153
  %5708 = vst.msk [vmem:[%s3 + $0x290] sm:$0xff] %vm5625, %v5154
  %5709 = vst.msk [vmem:[%s3 + $0x298] sm:$0xff] %vm5625, %v5155
  %5710 = vst.msk [vmem:[%s3 + $0x2a0] sm:$0xff] %vm5625, %v5156
  %5711 = vst.msk [vmem:[%s3 + $0x2a8] sm:$0xff] %vm5625, %v5157
  %5712 = vst.msk [vmem:[%s3 + $0x2b0] sm:$0xff] %vm5625, %v5158
  %5713 = vst.msk [vmem:[%s3 + $0x2b8] sm:$0xff] %vm5625, %v5159
  %5714 = vst.msk [vmem:[%s3 + $0x2c0] sm:$0xff] %vm5625, %v5160
  %5715 = vst.msk [vmem:[%s3 + $0x2c8] sm:$0xff] %vm5625, %v5161
  %5716 = vst.msk [vmem:[%s3 + $0x2d0] sm:$0xff] %vm5625, %v5162
  %5717 = vst.msk [vmem:[%s3 + $0x2d8] sm:$0xff] %vm5625, %v5163
  %5718 = vst.msk [vmem:[%s3 + $0x2e0] sm:$0xff] %vm5625, %v5164
  %5719 = vst.msk [vmem:[%s3 + $0x2e8] sm:$0xff] %vm5625, %v5165
  %5720 = vst.msk [vmem:[%s3 + $0x2f0] sm:$0xff] %vm5625, %v5166
  %5721 = vst.msk [vmem:[%s3 + $0x2f8] sm:$0xff] %vm5625, %v5167
  %5722 = vst.msk [vmem:[%s3 + $0x300] sm:$0xff] %vm5625, %v5168
  %5723 = vst.msk [vmem:[%s3 + $0x308] sm:$0xff] %vm5625, %v5169
  %5724 = vst.msk [vmem:[%s3 + $0x310] sm:$0xff] %vm5625, %v5170
  %5725 = vst.msk [vmem:[%s3 + $0x318] sm:$0xff] %vm5625, %v5171
  %5726 = vst.msk [vmem:[%s3 + $0x320] sm:$0xff] %vm5625, %v5172
  %5727 = vst.msk [vmem:[%s3 + $0x328] sm:$0xff] %vm5625, %v5173
  %5728 = vst.msk [vmem:[%s3 + $0x330] sm:$0xff] %vm5625, %v5174
  %5729 = vst.msk [vmem:[%s3 + $0x338] sm:$0xff] %vm5625, %v5175
  %5730 = vst.msk [vmem:[%s3 + $0x340] sm:$0xff] %vm5625, %v5176
  %5731 = vst.msk [vmem:[%s3 + $0x348] sm:$0xff] %vm5625, %v5177
  %5732 = vst.msk [vmem:[%s3 + $0x350] sm:$0xff] %vm5625, %v5178
  %5733 = vst.msk [vmem:[%s3 + $0x358] sm:$0xff] %vm5625, %v5179
  %5734 = vst.msk [vmem:[%s3 + $0x360] sm:$0xff] %vm5625, %v5180
  %5735 = vst.msk [vmem:[%s3 + $0x368] sm:$0xff] %vm5625, %v5181
  %5736 = vst.msk [vmem:[%s3 + $0x370] sm:$0xff] %vm5625, %v5182
  %5737 = vst.msk [vmem:[%s3 + $0x378] sm:$0xff] %vm5625, %v5183
  %5738 = vst.msk [vmem:[%s3 + $0x380] sm:$0xff] %vm5625, %v5184
  %5739 = vst.msk [vmem:[%s3 + $0x388] sm:$0xff] %vm5625, %v5185
  %5740 = vst.msk [vmem:[%s3 + $0x390] sm:$0xff] %vm5625, %v5186
  %5741 = vst.msk [vmem:[%s3 + $0x398] sm:$0xff] %vm5625, %v5187
  %5742 = vst.msk [vmem:[%s3 + $0x3a0] sm:$0xff] %vm5625, %v5188
  %5743 = vst.msk [vmem:[%s3 + $0x3a8] sm:$0xff] %vm5625, %v5189
  %5744 = vst.msk [vmem:[%s3 + $0x3b0] sm:$0xff] %vm5625, %v5190
  %5745 = vst.msk [vmem:[%s3 + $0x3b8] sm:$0xff] %vm5625, %v5191
  %5746 = vst.msk [vmem:[%s3 + $0x3c0] sm:$0xff] %vm5625, %v5192
  %5747 = vst.msk [vmem:[%s3 + $0x3c8] sm:$0xff] %vm5625, %v5193
  %5748 = vst.msk [vmem:[%s3 + $0x3d0] sm:$0xff] %vm5625, %v5194
  %5749 = vst.msk [vmem:[%s3 + $0x3d8] sm:$0xff] %vm5625, %v5195
  %5750 = vst.msk [vmem:[%s3 + $0x3e0] sm:$0xff] %vm5625, %v5196
  %5751 = vst.msk [vmem:[%s3 + $0x3e8] sm:$0xff] %vm5625, %v5197
  %5752 = vst.msk [vmem:[%s3 + $0x3f0] sm:$0xff] %vm5625, %v5198
  %5753 = vst.msk [vmem:[%s3 + $0x3f8] sm:$0xff] %vm5625, %v5199
  %5754 = vst.msk [vmem:[%s3 + $0x400] sm:$0xff] %vm5625, %v5200
  %5755 = vst.msk [vmem:[%s3 + $0x408] sm:$0xff] %vm5625, %v5201
  %5756 = vst.msk [vmem:[%s3 + $0x410] sm:$0xff] %vm5625, %v5202
  %5757 = vst.msk [vmem:[%s3 + $0x418] sm:$0xff] %vm5625, %v5203
  %5758 = vst.msk [vmem:[%s3 + $0x420] sm:$0xff] %vm5625, %v5204
  %5759 = vst.msk [vmem:[%s3 + $0x428] sm:$0xff] %vm5625, %v5205
  %5760 = vst.msk [vmem:[%s3 + $0x430] sm:$0xff] %vm5625, %v5206
  %5761 = vst.msk [vmem:[%s3 + $0x438] sm:$0xff] %vm5625, %v5207
  %5762 = vst.msk [vmem:[%s3 + $0x440] sm:$0xff] %vm5625, %v5208
  %5763 = vst.msk [vmem:[%s3 + $0x448] sm:$0xff] %vm5625, %v5209
  %5764 = vst.msk [vmem:[%s3 + $0x450] sm:$0xff] %vm5625, %v5210
  %5765 = vst.msk [vmem:[%s3 + $0x458] sm:$0xff] %vm5625, %v5211
  %5766 = vst.msk [vmem:[%s3 + $0x460] sm:$0xff] %vm5625, %v5212
  %5767 = vst.msk [vmem:[%s3 + $0x468] sm:$0xff] %vm5625, %v5213
  %5768 = vst.msk [vmem:[%s3 + $0x470] sm:$0xff] %vm5625, %v5214
  %5769 = vst.msk [vmem:[%s3 + $0x478] sm:$0xff] %vm5625, %v5215
  %5770 = vst.msk [vmem:[%s3 + $0x480] sm:$0xff] %vm5625, %v5216
  %5771 = vst.msk [vmem:[%s3 + $0x488] sm:$0xff] %vm5625, %v5217
  %5772 = vst.msk [vmem:[%s3 + $0x490] sm:$0xff] %vm5625, %v5218
  %5773 = vst.msk [vmem:[%s3 + $0x498] sm:$0xff] %vm5625, %v5219
  %5774 = vst.msk [vmem:[%s3 + $0x4a0] sm:$0xff] %vm5625, %v5220
  %5775 = vst.msk [vmem:[%s3 + $0x4a8] sm:$0xff] %vm5625, %v5221
  %5776 = vst.msk [vmem:[%s3 + $0x4b0] sm:$0xff] %vm5625, %v5222
  %5777 = vst.msk [vmem:[%s3 + $0x4b8] sm:$0xff] %vm5625, %v5223
  %5778 = vst.msk [vmem:[%s3 + $0x4c0] sm:$0xff] %vm5625, %v5224
  %5779 = vst.msk [vmem:[%s3 + $0x4c8] sm:$0xff] %vm5625, %v5225
  %5780 = vst.msk [vmem:[%s3 + $0x4d0] sm:$0xff] %vm5625, %v5226
  %5781 = vst.msk [vmem:[%s3 + $0x4d8] sm:$0xff] %vm5625, %v5227
  %5782 = vst.msk [vmem:[%s3 + $0x4e0] sm:$0xff] %vm5625, %v5228
  %5783 = vst.msk [vmem:[%s3 + $0x4e8] sm:$0xff] %vm5625, %v5229
  %5784 = vst.msk [vmem:[%s3 + $0x4f0] sm:$0xff] %vm5625, %v5230
  %5785 = vst.msk [vmem:[%s3 + $0x4f8] sm:$0xff] %vm5625, %v5231
  %5786 = vst.msk [vmem:[%s3 + $0x500] sm:$0xff] %vm5625, %v5232
  %5787 = vst.msk [vmem:[%s3 + $0x508] sm:$0xff] %vm5625, %v5233
  %5788 = vst.msk [vmem:[%s3 + $0x510] sm:$0xff] %vm5625, %v5234
  %5789 = vst.msk [vmem:[%s3 + $0x518] sm:$0xff] %vm5625, %v5235
  %5790 = vst.msk [vmem:[%s3 + $0x520] sm:$0xff] %vm5625, %v5236
  %5791 = vst.msk [vmem:[%s3 + $0x528] sm:$0xff] %vm5625, %v5237
  %5792 = vst.msk [vmem:[%s3 + $0x530] sm:$0xff] %vm5625, %v5238
  %5793 = vst.msk [vmem:[%s3 + $0x538] sm:$0xff] %vm5625, %v5239
  %5794 = vst.msk [vmem:[%s3 + $0x540] sm:$0xff] %vm5625, %v5240
  %5795 = vst.msk [vmem:[%s3 + $0x548] sm:$0xff] %vm5625, %v5241
  %5796 = vst.msk [vmem:[%s3 + $0x550] sm:$0xff] %vm5625, %v5242
  %5797 = vst.msk [vmem:[%s3 + $0x558] sm:$0xff] %vm5625, %v5243
  %5798 = vst.msk [vmem:[%s3 + $0x560] sm:$0xff] %vm5625, %v5244
  %5799 = vst.msk [vmem:[%s3 + $0x568] sm:$0xff] %vm5625, %v5245
  %5800 = vst.msk [vmem:[%s3 + $0x570] sm:$0xff] %vm5625, %v5246
  %5801 = vst.msk [vmem:[%s3 + $0x578] sm:$0xff] %vm5625, %v5247
  %5802 = vst.msk [vmem:[%s3 + $0x580] sm:$0xff] %vm5625, %v5248
  %5803 = vst.msk [vmem:[%s3 + $0x588] sm:$0xff] %vm5625, %v5249
  %5804 = vst.msk [vmem:[%s3 + $0x590] sm:$0xff] %vm5625, %v5250
  %5805 = vst.msk [vmem:[%s3 + $0x598] sm:$0xff] %vm5625, %v5251
  %5806 = vst.msk [vmem:[%s3 + $0x5a0] sm:$0xff] %vm5625, %v5252
  %5807 = vst.msk [vmem:[%s3 + $0x5a8] sm:$0xff] %vm5625, %v5253
  %5808 = vst.msk [vmem:[%s3 + $0x5b0] sm:$0xff] %vm5625, %v5254
  %5809 = vst.msk [vmem:[%s3 + $0x5b8] sm:$0xff] %vm5625, %v5255
  %5810 = vst.msk [vmem:[%s3 + $0x5c0] sm:$0xff] %vm5625, %v5256
  %5811 = vst.msk [vmem:[%s3 + $0x5c8] sm:$0xff] %vm5625, %v5257
  %5812 = vst.msk [vmem:[%s3 + $0x5d0] sm:$0xff] %vm5625, %v5258
  %5813 = vst.msk [vmem:[%s3 + $0x5d8] sm:$0xff] %vm5625, %v5259
  %5814 = vst.msk [vmem:[%s3 + $0x5e0] sm:$0xff] %vm5625, %v5260
  %5815 = vst.msk [vmem:[%s3 + $0x5e8] sm:$0xff] %vm5625, %v5261
  %5816 = vst.msk [vmem:[%s3 + $0x5f0] sm:$0xff] %vm5625, %v5262
  %5817 = vst.msk [vmem:[%s3 + $0x5f8] sm:$0xff] %vm5625, %v5263
  %5818 = vst.msk [vmem:[%s3 + $0x600] sm:$0xff] %vm5625, %v5264
  %5819 = vst.msk [vmem:[%s3 + $0x608] sm:$0xff] %vm5625, %v5265
  %5820 = vst.msk [vmem:[%s3 + $0x610] sm:$0xff] %vm5625, %v5266
  %5821 = vst.msk [vmem:[%s3 + $0x618] sm:$0xff] %vm5625, %v5267
  %5822 = vst.msk [vmem:[%s3 + $0x620] sm:$0xff] %vm5625, %v5268
  %5823 = vst.msk [vmem:[%s3 + $0x628] sm:$0xff] %vm5625, %v5269
  %5824 = vst.msk [vmem:[%s3 + $0x630] sm:$0xff] %vm5625, %v5270
  %5825 = vst.msk [vmem:[%s3 + $0x638] sm:$0xff] %vm5625, %v5271
  %5826 = vst.msk [vmem:[%s3 + $0x640] sm:$0xff] %vm5625, %v5272
  %5827 = vst.msk [vmem:[%s3 + $0x648] sm:$0xff] %vm5625, %v5273
  %5828 = vst.msk [vmem:[%s3 + $0x650] sm:$0xff] %vm5625, %v5274
  %5829 = vst.msk [vmem:[%s3 + $0x658] sm:$0xff] %vm5625, %v5275
  %5830 = vst.msk [vmem:[%s3 + $0x660] sm:$0xff] %vm5625, %v5276
  %5831 = vst.msk [vmem:[%s3 + $0x668] sm:$0xff] %vm5625, %v5277
  %5832 = vst.msk [vmem:[%s3 + $0x670] sm:$0xff] %vm5625, %v5278
  %5833 = vst.msk [vmem:[%s3 + $0x678] sm:$0xff] %vm5625, %v5279
  %5834 = vst.msk [vmem:[%s3 + $0x680] sm:$0xff] %vm5625, %v5280
  %5835 = vst.msk [vmem:[%s3 + $0x688] sm:$0xff] %vm5625, %v5281
  %5836 = vst.msk [vmem:[%s3 + $0x690] sm:$0xff] %vm5625, %v5282
  %5837 = vst.msk [vmem:[%s3 + $0x698] sm:$0xff] %vm5625, %v5283
  %5838 = vst.msk [vmem:[%s3 + $0x6a0] sm:$0xff] %vm5625, %v5284
  %5839 = vst.msk [vmem:[%s3 + $0x6a8] sm:$0xff] %vm5625, %v5285
  %5840 = vst.msk [vmem:[%s3 + $0x6b0] sm:$0xff] %vm5625, %v5286
  %5841 = vst.msk [vmem:[%s3 + $0x6b8] sm:$0xff] %vm5625, %v5287
  %5842 = vst.msk [vmem:[%s3 + $0x6c0] sm:$0xff] %vm5625, %v5288
  %5843 = vst.msk [vmem:[%s3 + $0x6c8] sm:$0xff] %vm5625, %v5289
  %5844 = vst.msk [vmem:[%s3 + $0x6d0] sm:$0xff] %vm5625, %v5290
  %5845 = vst.msk [vmem:[%s3 + $0x6d8] sm:$0xff] %vm5625, %v5291
  %5846 = vst.msk [vmem:[%s3 + $0x6e0] sm:$0xff] %vm5625, %v5292
  %5847 = vst.msk [vmem:[%s3 + $0x6e8] sm:$0xff] %vm5625, %v5293
  %5848 = vst.msk [vmem:[%s3 + $0x6f0] sm:$0xff] %vm5625, %v5294
  %5849 = vst.msk [vmem:[%s3 + $0x6f8] sm:$0xff] %vm5625, %v5295
  %5850 = vst.msk [vmem:[%s3 + $0x700] sm:$0xff] %vm5625, %v5296
  %5851 = vst.msk [vmem:[%s3 + $0x708] sm:$0xff] %vm5625, %v5297
  %5852 = vst.msk [vmem:[%s3 + $0x710] sm:$0xff] %vm5625, %v5298
  %5853 = vst.msk [vmem:[%s3 + $0x718] sm:$0xff] %vm5625, %v5299
  %5854 = vst.msk [vmem:[%s3 + $0x720] sm:$0xff] %vm5625, %v5300
  %5855 = vst.msk [vmem:[%s3 + $0x728] sm:$0xff] %vm5625, %v5301
  %5856 = vst.msk [vmem:[%s3 + $0x730] sm:$0xff] %vm5625, %v5302
  %5857 = vst.msk [vmem:[%s3 + $0x738] sm:$0xff] %vm5625, %v5303
  %5858 = vst.msk [vmem:[%s3 + $0x740] sm:$0xff] %vm5625, %v5304
  %5859 = vst.msk [vmem:[%s3 + $0x748] sm:$0xff] %vm5625, %v5305
  %5860 = vst.msk [vmem:[%s3 + $0x750] sm:$0xff] %vm5625, %v5306
  %5861 = vst.msk [vmem:[%s3 + $0x758] sm:$0xff] %vm5625, %v5307
  %5862 = vst.msk [vmem:[%s3 + $0x760] sm:$0xff] %vm5625, %v5308
  %5863 = vst.msk [vmem:[%s3 + $0x768] sm:$0xff] %vm5625, %v5309
  %5864 = vst.msk [vmem:[%s3 + $0x770] sm:$0xff] %vm5625, %v5310
  %5865 = vst.msk [vmem:[%s3 + $0x778] sm:$0xff] %vm5625, %v5311
  %5866 = vst.msk [vmem:[%s3 + $0x780] sm:$0xff] %vm5625, %v5312
  %5867 = vst.msk [vmem:[%s3 + $0x788] sm:$0xff] %vm5625, %v5313
  %5868 = vst.msk [vmem:[%s3 + $0x790] sm:$0xff] %vm5625, %v5314
  %5869 = vst.msk [vmem:[%s3 + $0x798] sm:$0xff] %vm5625, %v5315
  %5870 = vst.msk [vmem:[%s3 + $0x7a0] sm:$0xff] %vm5625, %v5316
  %5871 = vst.msk [vmem:[%s3 + $0x7a8] sm:$0xff] %vm5625, %v5317
  %5872 = vst.msk [vmem:[%s3 + $0x7b0] sm:$0xff] %vm5625, %v5318
  %5873 = vst.msk [vmem:[%s3 + $0x7b8] sm:$0xff] %vm5625, %v5319
  %5874 = vst.msk [vmem:[%s3 + $0x7c0] sm:$0xff] %vm5625, %v5320
  %5875 = vst.msk [vmem:[%s3 + $0x7c8] sm:$0xff] %vm5625, %v5321
  %5876 = vst.msk [vmem:[%s3 + $0x7d0] sm:$0xff] %vm5625, %v5322
  %5877 = vst.msk [vmem:[%s3 + $0x7d8] sm:$0xff] %vm5625, %v5323
  %5878 = vst.msk [vmem:[%s3 + $0x7e0] sm:$0xff] %vm5625, %v5324
  %5879 = vst.msk [vmem:[%s3 + $0x7e8] sm:$0xff] %vm5625, %v5325
  %5880 = vst.msk [vmem:[%s3 + $0x7f0] sm:$0xff] %vm5625, %v5326
  %5881 = vst.msk [vmem:[%s3 + $0x7f8] sm:$0xff] %vm5625, %v5327
  %5882 = vst.msk [vmem:[%s3 + $0x800] sm:$0xff] %vm5625, %v5328
  %5883 = vst.msk [vmem:[%s3 + $0x808] sm:$0xff] %vm5625, %v5329
  %5884 = vst.msk [vmem:[%s3 + $0x810] sm:$0xff] %vm5625, %v5330
  %5885 = vst.msk [vmem:[%s3 + $0x818] sm:$0xff] %vm5625, %v5331
  %5886 = vst.msk [vmem:[%s3 + $0x820] sm:$0xff] %vm5625, %v5332
  %5887 = vst.msk [vmem:[%s3 + $0x828] sm:$0xff] %vm5625, %v5333
  %5888 = vst.msk [vmem:[%s3 + $0x830] sm:$0xff] %vm5625, %v5334
  %5889 = vst.msk [vmem:[%s3 + $0x838] sm:$0xff] %vm5625, %v5335
  %5890 = vst.msk [vmem:[%s3 + $0x840] sm:$0xff] %vm5625, %v5336
  %5891 = vst.msk [vmem:[%s3 + $0x848] sm:$0xff] %vm5625, %v5337
  %5892 = vst.msk [vmem:[%s3 + $0x850] sm:$0xff] %vm5625, %v5338
  %5893 = vst.msk [vmem:[%s3 + $0x858] sm:$0xff] %vm5625, %v5339
  %5894 = vst.msk [vmem:[%s3 + $0x860] sm:$0xff] %vm5625, %v5340
  %5895 = vst.msk [vmem:[%s3 + $0x868] sm:$0xff] %vm5625, %v5341
  %5896 = vst.msk [vmem:[%s3 + $0x870] sm:$0xff] %vm5625, %v5342
  %5897 = vst.msk [vmem:[%s3 + $0x878] sm:$0xff] %vm5625, %v5343
  %5898 = vst.msk [vmem:[%s3 + $0x880] sm:$0xff] %vm5625, %v5344
  %5899 = vst.msk [vmem:[%s3 + $0x888] sm:$0xff] %vm5625, %v5345
  %5900 = vst.msk [vmem:[%s3 + $0x890] sm:$0xff] %vm5625, %v5346
  %5901 = vst.msk [vmem:[%s3 + $0x898] sm:$0xff] %vm5625, %v5347
  %5902 = vst.msk [vmem:[%s3 + $0x8a0] sm:$0xff] %vm5625, %v5348
  %5903 = vst.msk [vmem:[%s3 + $0x8a8] sm:$0xff] %vm5625, %v5349
  %5904 = vst.msk [vmem:[%s3 + $0x8b0] sm:$0xff] %vm5625, %v5350
  %5905 = vst.msk [vmem:[%s3 + $0x8b8] sm:$0xff] %vm5625, %v5351
  %5906 = vst.msk [vmem:[%s3 + $0x8c0] sm:$0xff] %vm5625, %v5352
  %5907 = vst.msk [vmem:[%s3 + $0x8c8] sm:$0xff] %vm5625, %v5353
  %5908 = vst.msk [vmem:[%s3 + $0x8d0] sm:$0xff] %vm5625, %v5354
  %5909 = vst.msk [vmem:[%s3 + $0x8d8] sm:$0xff] %vm5625, %v5355
  %5910 = vst.msk [vmem:[%s3 + $0x8e0] sm:$0xff] %vm5625, %v5356
  %5911 = vst.msk [vmem:[%s3 + $0x8e8] sm:$0xff] %vm5625, %v5357
  %5912 = vst.msk [vmem:[%s3 + $0x8f0] sm:$0xff] %vm5625, %v5358
  %5913 = vst.msk [vmem:[%s3 + $0x8f8] sm:$0xff] %vm5625, %v5359
  %5914 = vst.msk [vmem:[%s3 + $0x900] sm:$0xff] %vm5625, %v5360
  %5915 = vst.msk [vmem:[%s3 + $0x908] sm:$0xff] %vm5625, %v5361
  %5916 = vst.msk [vmem:[%s3 + $0x910] sm:$0xff] %vm5625, %v5362
  %5917 = vst.msk [vmem:[%s3 + $0x918] sm:$0xff] %vm5625, %v5363
  %5918 = vst.msk [vmem:[%s3 + $0x920] sm:$0xff] %vm5625, %v5364
  %5919 = vst.msk [vmem:[%s3 + $0x928] sm:$0xff] %vm5625, %v5365
  %5920 = vst.msk [vmem:[%s3 + $0x930] sm:$0xff] %vm5625, %v5366
  %5921 = vst.msk [vmem:[%s3 + $0x938] sm:$0xff] %vm5625, %v5367
  %5922 = vst.msk [vmem:[%s3 + $0x940] sm:$0xff] %vm5625, %v5368
  %5923 = vst.msk [vmem:[%s3 + $0x948] sm:$0xff] %vm5625, %v5369
  %5924 = vst.msk [vmem:[%s3 + $0x950] sm:$0xff] %vm5625, %v5370
  %5925 = vst.msk [vmem:[%s3 + $0x958] sm:$0xff] %vm5625, %v5371
  %5926 = vst.msk [vmem:[%s3 + $0x960] sm:$0xff] %vm5625, %v5372
  %5927 = vst.msk [vmem:[%s3 + $0x968] sm:$0xff] %vm5625, %v5373
  %5928 = vst.msk [vmem:[%s3 + $0x970] sm:$0xff] %vm5625, %v5374
  %5929 = vst.msk [vmem:[%s3 + $0x978] sm:$0xff] %vm5625, %v5375
  %5930 = vst.msk [vmem:[%s3 + $0x980] sm:$0xff] %vm5625, %v5376
  %5931 = vst.msk [vmem:[%s3 + $0x988] sm:$0xff] %vm5625, %v5377
  %5932 = vst.msk [vmem:[%s3 + $0x990] sm:$0xff] %vm5625, %v5378
  %5933 = vst.msk [vmem:[%s3 + $0x998] sm:$0xff] %vm5625, %v5379
  %5934 = vst.msk [vmem:[%s3 + $0x9a0] sm:$0xff] %vm5625, %v5380
  %5935 = vst.msk [vmem:[%s3 + $0x9a8] sm:$0xff] %vm5625, %v5381
  %5936 = vst.msk [vmem:[%s3 + $0x9b0] sm:$0xff] %vm5625, %v5382
  %5937 = vst.msk [vmem:[%s3 + $0x9b8] sm:$0xff] %vm5625, %v5383
  %5938 = vst.msk [vmem:[%s3 + $0x9c0] sm:$0xff] %vm5625, %v5384
  %5939 = vst.msk [vmem:[%s3 + $0x9c8] sm:$0xff] %vm5625, %v5385
  %5940 = vst.msk [vmem:[%s3 + $0x9d0] sm:$0xff] %vm5625, %v5386
  %5941 = vst.msk [vmem:[%s3 + $0x9d8] sm:$0xff] %vm5625, %v5387
  %5942 = vst.msk [vmem:[%s3 + $0x9e0] sm:$0xff] %vm5625, %v5388
  %5943 = vst.msk [vmem:[%s3 + $0x9e8] sm:$0xff] %vm5625, %v5389
  %5944 = vst.msk [vmem:[%s3 + $0x9f0] sm:$0xff] %vm5625, %v5390
  %5945 = vst.msk [vmem:[%s3 + $0x9f8] sm:$0xff] %vm5625, %v5391
  %5946 = vst.msk [vmem:[%s3 + $0xa00] sm:$0xff] %vm5625, %v5392
  %5947 = vst.msk [vmem:[%s3 + $0xa08] sm:$0xff] %vm5625, %v5393
  %5948 = vst.msk [vmem:[%s3 + $0xa10] sm:$0xff] %vm5625, %v5394
  %5949 = vst.msk [vmem:[%s3 + $0xa18] sm:$0xff] %vm5625, %v5395
  %5950 = vst.msk [vmem:[%s3 + $0xa20] sm:$0xff] %vm5625, %v5396
  %5951 = vst.msk [vmem:[%s3 + $0xa28] sm:$0xff] %vm5625, %v5397
  %5952 = vst.msk [vmem:[%s3 + $0xa30] sm:$0xff] %vm5625, %v5398
  %5953 = vst.msk [vmem:[%s3 + $0xa38] sm:$0xff] %vm5625, %v5399
  %5954 = vst.msk [vmem:[%s3 + $0xa40] sm:$0xff] %vm5625, %v5400
  %5955 = vst.msk [vmem:[%s3 + $0xa48] sm:$0xff] %vm5625, %v5401
  %5956 = vst.msk [vmem:[%s3 + $0xa50] sm:$0xff] %vm5625, %v5402
  %5957 = vst.msk [vmem:[%s3 + $0xa58] sm:$0xff] %vm5625, %v5403
  %5958 = vst.msk [vmem:[%s3 + $0xa60] sm:$0xff] %vm5625, %v5404
  %5959 = vst.msk [vmem:[%s3 + $0xa68] sm:$0xff] %vm5625, %v5405
  %5960 = vst.msk [vmem:[%s3 + $0xa70] sm:$0xff] %vm5625, %v5406
  %5961 = vst.msk [vmem:[%s3 + $0xa78] sm:$0xff] %vm5625, %v5407
  %5962 = vst.msk [vmem:[%s3 + $0xa80] sm:$0xff] %vm5625, %v5408
  %5963 = vst.msk [vmem:[%s3 + $0xa88] sm:$0xff] %vm5625, %v5409
  %5964 = vst.msk [vmem:[%s3 + $0xa90] sm:$0xff] %vm5625, %v5410
  %5965 = vst.msk [vmem:[%s3 + $0xa98] sm:$0xff] %vm5625, %v5411
  %5966 = vst.msk [vmem:[%s3 + $0xaa0] sm:$0xff] %vm5625, %v5412
  %5967 = vst.msk [vmem:[%s3 + $0xaa8] sm:$0xff] %vm5625, %v5413
  %5968 = vst.msk [vmem:[%s3 + $0xab0] sm:$0xff] %vm5625, %v5414
  %5969 = vst.msk [vmem:[%s3 + $0xab8] sm:$0xff] %vm5625, %v5415
  %5970 = vst.msk [vmem:[%s3 + $0xac0] sm:$0xff] %vm5625, %v5416
  %5971 = vst.msk [vmem:[%s3 + $0xac8] sm:$0xff] %vm5625, %v5417
  %5972 = vst.msk [vmem:[%s3 + $0xad0] sm:$0xff] %vm5625, %v5418
  %5973 = vst.msk [vmem:[%s3 + $0xad8] sm:$0xff] %vm5625, %v5419
  %5974 = vst.msk [vmem:[%s3 + $0xae0] sm:$0xff] %vm5625, %v5420
  %5975 = vst.msk [vmem:[%s3 + $0xae8] sm:$0xff] %vm5625, %v5421
  %5976 = vst.msk [vmem:[%s3 + $0xaf0] sm:$0xff] %vm5625, %v5422
  %5977 = vst.msk [vmem:[%s3 + $0xaf8] sm:$0xff] %vm5625, %v5423
  %5978 = vst.msk [vmem:[%s3 + $0xb00] sm:$0xff] %vm5625, %v5424
  %5979 = vst.msk [vmem:[%s3 + $0xb08] sm:$0xff] %vm5625, %v5425
  %5980 = vst.msk [vmem:[%s3 + $0xb10] sm:$0xff] %vm5625, %v5426
  %5981 = vst.msk [vmem:[%s3 + $0xb18] sm:$0xff] %vm5625, %v5427
  %5982 = vst.msk [vmem:[%s3 + $0xb20] sm:$0xff] %vm5625, %v5428
  %5983 = vst.msk [vmem:[%s3 + $0xb28] sm:$0xff] %vm5625, %v5429
  %5984 = vst.msk [vmem:[%s3 + $0xb30] sm:$0xff] %vm5625, %v5430
  %5985 = vst.msk [vmem:[%s3 + $0xb38] sm:$0xff] %vm5625, %v5431
  %5986 = vst.msk [vmem:[%s3 + $0xb40] sm:$0xff] %vm5625, %v5432
  %5987 = vst.msk [vmem:[%s3 + $0xb48] sm:$0xff] %vm5625, %v5433
  %5988 = vst.msk [vmem:[%s3 + $0xb50] sm:$0xff] %vm5625, %v5434
  %5989 = vst.msk [vmem:[%s3 + $0xb58] sm:$0xff] %vm5625, %v5435
  %5990 = vst.msk [vmem:[%s3 + $0xb60] sm:$0xff] %vm5625, %v5436
  %5991 = vst.msk [vmem:[%s3 + $0xb68] sm:$0xff] %vm5625, %v5437
  %5992 = vst.msk [vmem:[%s3 + $0xb70] sm:$0xff] %vm5625, %v5438
  %5993 = vst.msk [vmem:[%s3 + $0xb78] sm:$0xff] %vm5625, %v5439
  %5994 = vst.msk [vmem:[%s3 + $0xb80] sm:$0xff] %vm5625, %v5440
  %5995 = vst.msk [vmem:[%s3 + $0xb88] sm:$0xff] %vm5625, %v5441
  %5996 = vst.msk [vmem:[%s3 + $0xb90] sm:$0xff] %vm5625, %v5442
  %5997 = vst.msk [vmem:[%s3 + $0xb98] sm:$0xff] %vm5625, %v5443
  %5998 = vst.msk [vmem:[%s3 + $0xba0] sm:$0xff] %vm5625, %v5444
  %5999 = vst.msk [vmem:[%s3 + $0xba8] sm:$0xff] %vm5625, %v5445
  %6000 = vst.msk [vmem:[%s3 + $0xbb0] sm:$0xff] %vm5625, %v5446
  %6001 = vst.msk [vmem:[%s3 + $0xbb8] sm:$0xff] %vm5625, %v5447
  %6002 = vst.msk [vmem:[%s3 + $0xbc0] sm:$0xff] %vm5625, %v5448
  %6003 = vst.msk [vmem:[%s3 + $0xbc8] sm:$0xff] %vm5625, %v5449
  %6004 = vst.msk [vmem:[%s3 + $0xbd0] sm:$0xff] %vm5625, %v5450
  %6005 = vst.msk [vmem:[%s3 + $0xbd8] sm:$0xff] %vm5625, %v5451
  %6006 = vst.msk [vmem:[%s3 + $0xbe0] sm:$0xff] %vm5625, %v5452
  %6007 = vst.msk [vmem:[%s3 + $0xbe8] sm:$0xff] %vm5625, %v5453
  %6008 = vst.msk [vmem:[%s3 + $0xbf0] sm:$0xff] %vm5625, %v5454
  %6009 = vst.msk [vmem:[%s3 + $0xbf8] sm:$0xff] %vm5625, %v5455
  %6010 = vst.msk [vmem:[%s3 + $0xc00] sm:$0xff] %vm5625, %v5456
  %6011 = vst.msk [vmem:[%s3 + $0xc08] sm:$0xff] %vm5625, %v5457
  %6012 = vst.msk [vmem:[%s3 + $0xc10] sm:$0xff] %vm5625, %v5458
  %6013 = vst.msk [vmem:[%s3 + $0xc18] sm:$0xff] %vm5625, %v5459
  %6014 = vst.msk [vmem:[%s3 + $0xc20] sm:$0xff] %vm5625, %v5460
  %6015 = vst.msk [vmem:[%s3 + $0xc28] sm:$0xff] %vm5625, %v5461
  %6016 = vst.msk [vmem:[%s3 + $0xc30] sm:$0xff] %vm5625, %v5462
  %6017 = vst.msk [vmem:[%s3 + $0xc38] sm:$0xff] %vm5625, %v5463
  %6018 = vst.msk [vmem:[%s3 + $0xc40] sm:$0xff] %vm5625, %v5464
  %6019 = vst.msk [vmem:[%s3 + $0xc48] sm:$0xff] %vm5625, %v5465
  %6020 = vst.msk [vmem:[%s3 + $0xc50] sm:$0xff] %vm5625, %v5466
  %6021 = vst.msk [vmem:[%s3 + $0xc58] sm:$0xff] %vm5625, %v5467
  %6022 = vst.msk [vmem:[%s3 + $0xc60] sm:$0xff] %vm5625, %v5468
  %6023 = vst.msk [vmem:[%s3 + $0xc68] sm:$0xff] %vm5625, %v5469
  %6024 = vst.msk [vmem:[%s3 + $0xc70] sm:$0xff] %vm5625, %v5470
  %6025 = vst.msk [vmem:[%s3 + $0xc78] sm:$0xff] %vm5625, %v5471
  %6026 = vst.msk [vmem:[%s3 + $0xc80] sm:$0xff] %vm5625, %v5472
  %6027 = vst.msk [vmem:[%s3 + $0xc88] sm:$0xff] %vm5625, %v5473
  %6028 = vst.msk [vmem:[%s3 + $0xc90] sm:$0xff] %vm5625, %v5474
  %6029 = vst.msk [vmem:[%s3 + $0xc98] sm:$0xff] %vm5625, %v5475
  %6030 = vst.msk [vmem:[%s3 + $0xca0] sm:$0xff] %vm5625, %v5476
  %6031 = vst.msk [vmem:[%s3 + $0xca8] sm:$0xff] %vm5625, %v5477
  %6032 = vst.msk [vmem:[%s3 + $0xcb0] sm:$0xff] %vm5625, %v5478
  %6033 = vst.msk [vmem:[%s3 + $0xcb8] sm:$0xff] %vm5625, %v5479
  %6034 = vst.msk [vmem:[%s3 + $0xcc0] sm:$0xff] %vm5625, %v5480
  %6035 = vst.msk [vmem:[%s3 + $0xcc8] sm:$0xff] %vm5625, %v5481
  %6036 = vst.msk [vmem:[%s3 + $0xcd0] sm:$0xff] %vm5625, %v5482
  %6037 = vst.msk [vmem:[%s3 + $0xcd8] sm:$0xff] %vm5625, %v5483
  %6038 = vst.msk [vmem:[%s3 + $0xce0] sm:$0xff] %vm5625, %v5484
  %6039 = vst.msk [vmem:[%s3 + $0xce8] sm:$0xff] %vm5625, %v5485
  %6040 = vst.msk [vmem:[%s3 + $0xcf0] sm:$0xff] %vm5625, %v5486
  %6041 = vst.msk [vmem:[%s3 + $0xcf8] sm:$0xff] %vm5625, %v5487
  %6042 = vst.msk [vmem:[%s3 + $0xd00] sm:$0xff] %vm5625, %v5488
  %6043 = vst.msk [vmem:[%s3 + $0xd08] sm:$0xff] %vm5625, %v5489
  %6044 = vst.msk [vmem:[%s3 + $0xd10] sm:$0xff] %vm5625, %v5490
  %6045 = vst.msk [vmem:[%s3 + $0xd18] sm:$0xff] %vm5625, %v5491
  %6046 = vst.msk [vmem:[%s3 + $0xd20] sm:$0xff] %vm5625, %v5492
  %6047 = vst.msk [vmem:[%s3 + $0xd28] sm:$0xff] %vm5625, %v5493
  %6048 = vst.msk [vmem:[%s3 + $0xd30] sm:$0xff] %vm5625, %v5494
  %6049 = vst.msk [vmem:[%s3 + $0xd38] sm:$0xff] %vm5625, %v5495
  %6050 = vst.msk [vmem:[%s3 + $0xd40] sm:$0xff] %vm5625, %v5496
  %6051 = vst.msk [vmem:[%s3 + $0xd48] sm:$0xff] %vm5625, %v5497
  %6052 = vst.msk [vmem:[%s3 + $0xd50] sm:$0xff] %vm5625, %v5498
  %6053 = vst.msk [vmem:[%s3 + $0xd58] sm:$0xff] %vm5625, %v5499
  %6054 = vst.msk [vmem:[%s3 + $0xd60] sm:$0xff] %vm5625, %v5500
  %6055 = vst.msk [vmem:[%s3 + $0xd68] sm:$0xff] %vm5625, %v5501
  %6056 = vst.msk [vmem:[%s3 + $0xd70] sm:$0xff] %vm5625, %v5502
  %6057 = vst.msk [vmem:[%s3 + $0xd78] sm:$0xff] %vm5625, %v5503
  %6058 = vst.msk [vmem:[%s3 + $0xd80] sm:$0xff] %vm5625, %v5504
  %6059 = vst.msk [vmem:[%s3 + $0xd88] sm:$0xff] %vm5625, %v5505
  %6060 = vst.msk [vmem:[%s3 + $0xd90] sm:$0xff] %vm5625, %v5506
  %6061 = vst.msk [vmem:[%s3 + $0xd98] sm:$0xff] %vm5625, %v5507
  %6062 = vst.msk [vmem:[%s3 + $0xda0] sm:$0xff] %vm5625, %v5508
  %6063 = vst.msk [vmem:[%s3 + $0xda8] sm:$0xff] %vm5625, %v5509
  %6064 = vst.msk [vmem:[%s3 + $0xdb0] sm:$0xff] %vm5625, %v5510
  %6065 = vst.msk [vmem:[%s3 + $0xdb8] sm:$0xff] %vm5625, %v5511
  %6066 = vst.msk [vmem:[%s3 + $0xdc0] sm:$0xff] %vm5625, %v5512
  %6067 = vst.msk [vmem:[%s3 + $0xdc8] sm:$0xff] %vm5625, %v5513
  %6068 = vst.msk [vmem:[%s3 + $0xdd0] sm:$0xff] %vm5625, %v5514
  %6069 = vst.msk [vmem:[%s3 + $0xdd8] sm:$0xff] %vm5625, %v5515
  %6070 = vst.msk [vmem:[%s3 + $0xde0] sm:$0xff] %vm5625, %v5516
  %6071 = vst.msk [vmem:[%s3 + $0xde8] sm:$0xff] %vm5625, %v5517
  %6072 = vst.msk [vmem:[%s3 + $0xdf0] sm:$0xff] %vm5625, %v5518
  %6073 = vst.msk [vmem:[%s3 + $0xdf8] sm:$0xff] %vm5625, %v5519
  %6074 = vst.msk [vmem:[%s3 + $0xe00] sm:$0xff] %vm5625, %v5520
  %6075 = vst.msk [vmem:[%s3 + $0xe08] sm:$0xff] %vm5625, %v5521
  %6076 = vst.msk [vmem:[%s3 + $0xe10] sm:$0xff] %vm5625, %v5522
  %6077 = vst.msk [vmem:[%s3 + $0xe18] sm:$0xff] %vm5625, %v5523
  %6078 = vst.msk [vmem:[%s3 + $0xe20] sm:$0xff] %vm5625, %v5524
  %6079 = vst.msk [vmem:[%s3 + $0xe28] sm:$0xff] %vm5625, %v5525
  %6080 = vst.msk [vmem:[%s3 + $0xe30] sm:$0xff] %vm5625, %v5526
  %6081 = vst.msk [vmem:[%s3 + $0xe38] sm:$0xff] %vm5625, %v5527
  %6082 = vst.msk [vmem:[%s3 + $0xe40] sm:$0xff] %vm5625, %v5528
  %6083 = vst.msk [vmem:[%s3 + $0xe48] sm:$0xff] %vm5625, %v5529
  %6084 = vst.msk [vmem:[%s3 + $0xe50] sm:$0xff] %vm5625, %v5530
  %6085 = vst.msk [vmem:[%s3 + $0xe58] sm:$0xff] %vm5625, %v5531
  %6086 = vst.msk [vmem:[%s3 + $0xe60] sm:$0xff] %vm5625, %v5532
  %6087 = vst.msk [vmem:[%s3 + $0xe68] sm:$0xff] %vm5625, %v5533
  %6088 = vst.msk [vmem:[%s3 + $0xe70] sm:$0xff] %vm5625, %v5534
  %6089 = vst.msk [vmem:[%s3 + $0xe78] sm:$0xff] %vm5625, %v5535
  %6090 = vst.msk [vmem:[%s3 + $0xe80] sm:$0xff] %vm5625, %v5536
  %6091 = vst.msk [vmem:[%s3 + $0xe88] sm:$0xff] %vm5625, %v5537
  %6092 = vst.msk [vmem:[%s3 + $0xe90] sm:$0xff] %vm5625, %v5538
  %6093 = vst.msk [vmem:[%s3 + $0xe98] sm:$0xff] %vm5625, %v5539
  %6094 = vst.msk [vmem:[%s3 + $0xea0] sm:$0xff] %vm5625, %v5540
  %6095 = vst.msk [vmem:[%s3 + $0xea8] sm:$0xff] %vm5625, %v5541
  %6096 = vst.msk [vmem:[%s3 + $0xeb0] sm:$0xff] %vm5625, %v5542
  %6097 = vst.msk [vmem:[%s3 + $0xeb8] sm:$0xff] %vm5625, %v5543
  %6098 = vst.msk [vmem:[%s3 + $0xec0] sm:$0xff] %vm5625, %v5544
  %6099 = vst.msk [vmem:[%s3 + $0xec8] sm:$0xff] %vm5625, %v5545
  %6100 = vst.msk [vmem:[%s3 + $0xed0] sm:$0xff] %vm5625, %v5546
  %6101 = vst.msk [vmem:[%s3 + $0xed8] sm:$0xff] %vm5625, %v5547
  %6102 = vst.msk [vmem:[%s3 + $0xee0] sm:$0xff] %vm5625, %v5548
  %6103 = vst.msk [vmem:[%s3 + $0xee8] sm:$0xff] %vm5625, %v5549
  %6104 = vst.msk [vmem:[%s3 + $0xef0] sm:$0xff] %vm5625, %v5550
  %6105 = vst.msk [vmem:[%s3 + $0xef8] sm:$0xff] %vm5625, %v5551
  %6106 = vst.msk [vmem:[%s3 + $0xf00] sm:$0xff] %vm5625, %v5552
  %6107 = vst.msk [vmem:[%s3 + $0xf08] sm:$0xff] %vm5625, %v5553
  %6108 = vst.msk [vmem:[%s3 + $0xf10] sm:$0xff] %vm5625, %v5554
  %6109 = vst.msk [vmem:[%s3 + $0xf18] sm:$0xff] %vm5625, %v5555
  %6110 = vst.msk [vmem:[%s3 + $0xf20] sm:$0xff] %vm5625, %v5556
  %6111 = vst.msk [vmem:[%s3 + $0xf28] sm:$0xff] %vm5625, %v5557
  %6112 = vst.msk [vmem:[%s3 + $0xf30] sm:$0xff] %vm5625, %v5558
  %6113 = vst.msk [vmem:[%s3 + $0xf38] sm:$0xff] %vm5625, %v5559
  %6114 = vst.msk [vmem:[%s3 + $0xf40] sm:$0xff] %vm5625, %v5560
  %6115 = vst.msk [vmem:[%s3 + $0xf48] sm:$0xff] %vm5625, %v5561
  %6116 = vst.msk [vmem:[%s3 + $0xf50] sm:$0xff] %vm5625, %v5562
  %6117 = vst.msk [vmem:[%s3 + $0xf58] sm:$0xff] %vm5625, %v5563
  %6118 = vst.msk [vmem:[%s3 + $0xf60] sm:$0xff] %vm5625, %v5564
  %6119 = vst.msk [vmem:[%s3 + $0xf68] sm:$0xff] %vm5625, %v5565
  %6120 = vst.msk [vmem:[%s3 + $0xf70] sm:$0xff] %vm5625, %v5566
  %6121 = vst.msk [vmem:[%s3 + $0xf78] sm:$0xff] %vm5625, %v5567
  %6122 = vst.msk [vmem:[%s3 + $0xf80] sm:$0xff] %vm5625, %v5568
  %6123 = vst.msk [vmem:[%s3 + $0xf88] sm:$0xff] %vm5625, %v5569
  %6124 = vst.msk [vmem:[%s3 + $0xf90] sm:$0xff] %vm5625, %v5570
  %6125 = vst.msk [vmem:[%s3 + $0xf98] sm:$0xff] %vm5625, %v5571
  %6126 = vst.msk [vmem:[%s3 + $0xfa0] sm:$0xff] %vm5625, %v5572
  %6127 = vst.msk [vmem:[%s3 + $0xfa8] sm:$0xff] %vm5625, %v5573
  %6128 = vst.msk [vmem:[%s3 + $0xfb0] sm:$0xff] %vm5625, %v5574
  %6129 = vst.msk [vmem:[%s3 + $0xfb8] sm:$0xff] %vm5625, %v5575
  %6130 = vst.msk [vmem:[%s3 + $0xfc0] sm:$0xff] %vm5625, %v5576
  %6131 = vst.msk [vmem:[%s3 + $0xfc8] sm:$0xff] %vm5625, %v5577
  %6132 = vst.msk [vmem:[%s3 + $0xfd0] sm:$0xff] %vm5625, %v5578
  %6133 = vst.msk [vmem:[%s3 + $0xfd8] sm:$0xff] %vm5625, %v5579
  %6134 = vst.msk [vmem:[%s3 + $0xfe0] sm:$0xff] %vm5625, %v5580
  %6135 = vst.msk [vmem:[%s3 + $0xfe8] sm:$0xff] %vm5625, %v5581
  %6136 = vst.msk [vmem:[%s3 + $0xff0] sm:$0xff] %vm5625, %v5582
  %6137 = vst.msk [vmem:[%s3 + $0xff8] sm:$0xff] %vm5625, %v5583
  %6138 = vst.msk [vmem:[%s3 + $0x1000] sm:$0xff] %vm5625, %v5584
  %6139 = vst.msk [vmem:[%s3 + $0x1008] sm:$0xff] %vm5625, %v5585
  %6140 = vst.msk [vmem:[%s3 + $0x1010] sm:$0xff] %vm5625, %v5586
  %6141 = vst.msk [vmem:[%s3 + $0x1018] sm:$0xff] %vm5625, %v5587
  %6142 = vst.msk [vmem:[%s3 + $0x1020] sm:$0xff] %vm5625, %v5588
  %6143 = vst.msk [vmem:[%s3 + $0x1028] sm:$0xff] %vm5625, %v5589
  %6144 = vst.msk [vmem:[%s3 + $0x1030] sm:$0xff] %vm5625, %v5590
  %6145 = vst.msk [vmem:[%s3 + $0x1038] sm:$0xff] %vm5625, %v5591
  %6146 = vst.msk [vmem:[%s3 + $0x1040] sm:$0xff] %vm5625, %v5592
  %6147 = vst.msk [vmem:[%s3 + $0x1048] sm:$0xff] %vm5625, %v5593
  %6148 = vst.msk [vmem:[%s3 + $0x1050] sm:$0xff] %vm5625, %v5594
  %6149 = vst.msk [vmem:[%s3 + $0x1058] sm:$0xff] %vm5625, %v5595
  %6150 = vst.msk [vmem:[%s3 + $0x1060] sm:$0xff] %vm5625, %v5596
  %6151 = vst.msk [vmem:[%s3 + $0x1068] sm:$0xff] %vm5625, %v5597
  %6152 = vst.msk [vmem:[%s3 + $0x1070] sm:$0xff] %vm5625, %v5598
  %6153 = vst.msk [vmem:[%s3 + $0x1078] sm:$0xff] %vm5625, %v5599
  %6154 = vst.msk [vmem:[%s3 + $0x1080] sm:$0xff] %vm5625, %v5600
  %6155 = vst.msk [vmem:[%s3 + $0x1088] sm:$0xff] %vm5625, %v5601
  %6156 = vst.msk [vmem:[%s3 + $0x1090] sm:$0xff] %vm5625, %v5602
  %6157 = vst.msk [vmem:[%s3 + $0x1098] sm:$0xff] %vm5625, %v5603
  %6158 = vst.msk [vmem:[%s3 + $0x10a0] sm:$0xff] %vm5625, %v5604
  %6159 = vst.msk [vmem:[%s3 + $0x10a8] sm:$0xff] %vm5625, %v5605
  %6160 = vst.msk [vmem:[%s3 + $0x10b0] sm:$0xff] %vm5625, %v5606
  %6161 = vst.msk [vmem:[%s3 + $0x10b8] sm:$0xff] %vm5625, %v5607
  %6162 = vst.msk [vmem:[%s3 + $0x10c0] sm:$0xff] %vm5625, %v5608
  %6163 = vst.msk [vmem:[%s3 + $0x10c8] sm:$0xff] %vm5625, %v5609
  %6164 = vst.msk [vmem:[%s3 + $0x10d0] sm:$0xff] %vm5625, %v5610
  %6165 = vst.msk [vmem:[%s3 + $0x10d8] sm:$0xff] %vm5625, %v5611
  %6166 = vst.msk [vmem:[%s3 + $0x10e0] sm:$0xff] %vm5625, %v5612
  %6167 = vst.msk [vmem:[%s3 + $0x10e8] sm:$0xff] %vm5625, %v5613
  %6168 = vst.msk [vmem:[%s3 + $0x10f0] sm:$0xff] %vm5625, %v5614
  %6169 = vst.msk [vmem:[%s3 + $0x10f8] sm:$0xff] %vm5625, %v5615
  %6170 = vst.msk [vmem:[%s3 + $0x1100] sm:$0xff] %vm5625, %v5616
  %6171 = vst.msk [vmem:[%s3 + $0x1108] sm:$0xff] %vm5625, %v5617
  %6172 = vst.msk [vmem:[%s3 + $0x1110] sm:$0xff] %vm5625, %v5618
  %6173 = vst.msk [vmem:[%s3 + $0x1118] sm:$0xff] %vm5625, %v5619
  %6174 = vst.msk [vmem:[%s3 + $0x1120] sm:$0xff] %vm5625, %v5620
  %6175 = vst.msk [vmem:[%s3 + $0x1128] sm:$0xff] %vm5625, %v5621
  %6176 = vst.msk [vmem:[%s3 + $0x1130] sm:$0xff] %vm5625, %v5622
  %6177 = vst.msk [vmem:[%s3 + $0x1138] sm:$0xff] %vm5625, %v5623
  %vm6178 = vcmask 517120
  %6179 = vst.msk [vmem:[%s3 + $0x1140] sm:$0x3] %vm6178, %v5624
  // Predicated region
  $region14: #{alexnet_forward_pallas.5} parent=0 // pred_check
    _
  $region15: #{alexnet_forward_pallas.5} parent=0 // pred_check_branch
    %6181 = sbr.rel (0) target = $region17
  $region16: #{alexnet_forward_pallas.5} parent=0 // pred_region
    _
  $region17: #{alexnet_forward_pallas.5} parent=0 // pred_fallthru
    _
  // Predicated region
  $region18: #{alexnet_forward_pallas.5} parent=0 // pred_check
    _
  $region19: #{alexnet_forward_pallas.5} parent=0 // pred_check_branch
    %6183 = sbr.rel (0) target = $region21
  $region20: #{alexnet_forward_pallas.5} parent=0 // pred_region
    _
  $region21: #{alexnet_forward_pallas.5} parent=0 // pred_fallthru
    _

// kernel: alexnet_forward_pallas.6
$region0: #{alexnet_forward_pallas.6}
  #allocation0 [shape = 'u32[]', space=smem, size = 0x4, offset = 0x4, fixed_abs, tag = 'smem constant byte address 0x4 - core index']
  #allocation1 [shape = 'u32[144,128]{1,0:T(1,128)}', space=vmem, size = 0x12000, scoped, tag = 'internal scratch']
  %s0 = inlined_call_operand.vmem [shape: f32[9,1058,64], index: 0, kind: input, shape index: {}]
  %s1 = inlined_call_operand.vmem [shape: f32[1058,64], index: 1, kind: output, shape index: {}]
  %s2 = sld [smem:[#allocation0]]
  $region14: #{alexnet_forward_pallas.6} parent=0
    _
  %s4 = ssub.s32 1, %s2
  %s5 = scalar_select 0, %s4, %s2
  // Predicated region
  $region2: #{alexnet_forward_pallas.6} parent=0 // pred_check
    _
  $region3: #{alexnet_forward_pallas.6} parent=0 // pred_check_branch
    %7 = sbr.rel (0) target = $region5
  $region4: #{alexnet_forward_pallas.6} parent=0 // pred_region
    _
  $region5: #{alexnet_forward_pallas.6} parent=0 // pred_fallthru
    _
  %v8 = vld [vmem:[%s0] sm:$0xff]
  %v9 = vld [vmem:[%s0 + $0x8] sm:$0xff]
  %v10 = vld [vmem:[%s0 + $0x10] sm:$0xff]
  %v11 = vld [vmem:[%s0 + $0x18] sm:$0xff]
  %v12 = vld [vmem:[%s0 + $0x20] sm:$0xff]
  %v13 = vld [vmem:[%s0 + $0x28] sm:$0xff]
  %v14 = vld [vmem:[%s0 + $0x30] sm:$0xff]
  %v15 = vld [vmem:[%s0 + $0x38] sm:$0xff]
  %v16 = vld [vmem:[%s0 + $0x40] sm:$0xff]
  %v17 = vld [vmem:[%s0 + $0x48] sm:$0xff]
  %v18 = vld [vmem:[%s0 + $0x50] sm:$0xff]
  %v19 = vld [vmem:[%s0 + $0x58] sm:$0xff]
  %v20 = vld [vmem:[%s0 + $0x60] sm:$0xff]
  %v21 = vld [vmem:[%s0 + $0x68] sm:$0xff]
  %v22 = vld [vmem:[%s0 + $0x70] sm:$0xff]
  %v23 = vld [vmem:[%s0 + $0x78] sm:$0xff]
  %v24 = vld [vmem:[%s0 + $0x80] sm:$0xff]
  %v25 = vld [vmem:[%s0 + $0x88] sm:$0xff]
  %v26 = vld [vmem:[%s0 + $0x90] sm:$0xff]
  %v27 = vld [vmem:[%s0 + $0x98] sm:$0xff]
  %v28 = vld [vmem:[%s0 + $0xa0] sm:$0xff]
  %v29 = vld [vmem:[%s0 + $0xa8] sm:$0xff]
  %v30 = vld [vmem:[%s0 + $0xb0] sm:$0xff]
  %v31 = vld [vmem:[%s0 + $0xb8] sm:$0xff]
  %v32 = vld [vmem:[%s0 + $0xc0] sm:$0xff]
  %v33 = vld [vmem:[%s0 + $0xc8] sm:$0xff]
  %v34 = vld [vmem:[%s0 + $0xd0] sm:$0xff]
  %v35 = vld [vmem:[%s0 + $0xd8] sm:$0xff]
  %v36 = vld [vmem:[%s0 + $0xe0] sm:$0xff]
  %v37 = vld [vmem:[%s0 + $0xe8] sm:$0xff]
  %v38 = vld [vmem:[%s0 + $0xf0] sm:$0xff]
  %v39 = vld [vmem:[%s0 + $0xf8] sm:$0xff]
  %v40 = vld [vmem:[%s0 + $0x100] sm:$0xff]
  %v41 = vld [vmem:[%s0 + $0x108] sm:$0xff]
  %v42 = vld [vmem:[%s0 + $0x110] sm:$0xff]
  %v43 = vld [vmem:[%s0 + $0x118] sm:$0xff]
  %v44 = vld [vmem:[%s0 + $0x120] sm:$0xff]
  %v45 = vld [vmem:[%s0 + $0x128] sm:$0xff]
  %v46 = vld [vmem:[%s0 + $0x130] sm:$0xff]
  %v47 = vld [vmem:[%s0 + $0x138] sm:$0xff]
  %v48 = vld [vmem:[%s0 + $0x140] sm:$0xff]
  %v49 = vld [vmem:[%s0 + $0x148] sm:$0xff]
  %v50 = vld [vmem:[%s0 + $0x150] sm:$0xff]
  %v51 = vld [vmem:[%s0 + $0x158] sm:$0xff]
  %v52 = vld [vmem:[%s0 + $0x160] sm:$0xff]
  %v53 = vld [vmem:[%s0 + $0x168] sm:$0xff]
  %v54 = vld [vmem:[%s0 + $0x170] sm:$0xff]
  %v55 = vld [vmem:[%s0 + $0x178] sm:$0xff]
  %v56 = vld [vmem:[%s0 + $0x180] sm:$0xff]
  %v57 = vld [vmem:[%s0 + $0x188] sm:$0xff]
  %v58 = vld [vmem:[%s0 + $0x190] sm:$0xff]
  %v59 = vld [vmem:[%s0 + $0x198] sm:$0xff]
  %v60 = vld [vmem:[%s0 + $0x1a0] sm:$0xff]
  %v61 = vld [vmem:[%s0 + $0x1a8] sm:$0xff]
  %v62 = vld [vmem:[%s0 + $0x1b0] sm:$0xff]
  %v63 = vld [vmem:[%s0 + $0x1b8] sm:$0xff]
  %v64 = vld [vmem:[%s0 + $0x1c0] sm:$0xff]
  %v65 = vld [vmem:[%s0 + $0x1c8] sm:$0xff]
  %v66 = vld [vmem:[%s0 + $0x1d0] sm:$0xff]
  %v67 = vld [vmem:[%s0 + $0x1d8] sm:$0xff]
  %v68 = vld [vmem:[%s0 + $0x1e0] sm:$0xff]
  %v69 = vld [vmem:[%s0 + $0x1e8] sm:$0xff]
  %v70 = vld [vmem:[%s0 + $0x1f0] sm:$0xff]
  %v71 = vld [vmem:[%s0 + $0x1f8] sm:$0xff]
  %v72 = vld [vmem:[%s0 + $0x200] sm:$0xff]
  %v73 = vld [vmem:[%s0 + $0x208] sm:$0xff]
  %v74 = vld [vmem:[%s0 + $0x210] sm:$0xff]
  %v75 = vld [vmem:[%s0 + $0x218] sm:$0xff]
  %v76 = vld [vmem:[%s0 + $0x220] sm:$0xff]
  %v77 = vld [vmem:[%s0 + $0x228] sm:$0xff]
  %v78 = vld [vmem:[%s0 + $0x230] sm:$0xff]
  %v79 = vld [vmem:[%s0 + $0x238] sm:$0xff]
  %v80 = vld [vmem:[%s0 + $0x240] sm:$0xff]
  %v81 = vld [vmem:[%s0 + $0x248] sm:$0xff]
  %v82 = vld [vmem:[%s0 + $0x250] sm:$0xff]
  %v83 = vld [vmem:[%s0 + $0x258] sm:$0xff]
  %v84 = vld [vmem:[%s0 + $0x260] sm:$0xff]
  %v85 = vld [vmem:[%s0 + $0x268] sm:$0xff]
  %v86 = vld [vmem:[%s0 + $0x270] sm:$0xff]
  %v87 = vld [vmem:[%s0 + $0x278] sm:$0xff]
  %v88 = vld [vmem:[%s0 + $0x280] sm:$0xff]
  %v89 = vld [vmem:[%s0 + $0x288] sm:$0xff]
  %v90 = vld [vmem:[%s0 + $0x290] sm:$0xff]
  %v91 = vld [vmem:[%s0 + $0x298] sm:$0xff]
  %v92 = vld [vmem:[%s0 + $0x2a0] sm:$0xff]
  %v93 = vld [vmem:[%s0 + $0x2a8] sm:$0xff]
  %v94 = vld [vmem:[%s0 + $0x2b0] sm:$0xff]
  %v95 = vld [vmem:[%s0 + $0x2b8] sm:$0xff]
  %v96 = vld [vmem:[%s0 + $0x2c0] sm:$0xff]
  %v97 = vld [vmem:[%s0 + $0x2c8] sm:$0xff]
  %v98 = vld [vmem:[%s0 + $0x2d0] sm:$0xff]
  %v99 = vld [vmem:[%s0 + $0x2d8] sm:$0xff]
  %v100 = vld [vmem:[%s0 + $0x2e0] sm:$0xff]
  %v101 = vld [vmem:[%s0 + $0x2e8] sm:$0xff]
  %v102 = vld [vmem:[%s0 + $0x2f0] sm:$0xff]
  %v103 = vld [vmem:[%s0 + $0x2f8] sm:$0xff]
  %v104 = vld [vmem:[%s0 + $0x300] sm:$0xff]
  %v105 = vld [vmem:[%s0 + $0x308] sm:$0xff]
  %v106 = vld [vmem:[%s0 + $0x310] sm:$0xff]
  %v107 = vld [vmem:[%s0 + $0x318] sm:$0xff]
  %v108 = vld [vmem:[%s0 + $0x320] sm:$0xff]
  %v109 = vld [vmem:[%s0 + $0x328] sm:$0xff]
  %v110 = vld [vmem:[%s0 + $0x330] sm:$0xff]
  %v111 = vld [vmem:[%s0 + $0x338] sm:$0xff]
  %v112 = vld [vmem:[%s0 + $0x340] sm:$0xff]
  %v113 = vld [vmem:[%s0 + $0x348] sm:$0xff]
  %v114 = vld [vmem:[%s0 + $0x350] sm:$0xff]
  %v115 = vld [vmem:[%s0 + $0x358] sm:$0xff]
  %v116 = vld [vmem:[%s0 + $0x360] sm:$0xff]
  %v117 = vld [vmem:[%s0 + $0x368] sm:$0xff]
  %v118 = vld [vmem:[%s0 + $0x370] sm:$0xff]
  %v119 = vld [vmem:[%s0 + $0x378] sm:$0xff]
  %v120 = vld [vmem:[%s0 + $0x380] sm:$0xff]
  %v121 = vld [vmem:[%s0 + $0x388] sm:$0xff]
  %v122 = vld [vmem:[%s0 + $0x390] sm:$0xff]
  %v123 = vld [vmem:[%s0 + $0x398] sm:$0xff]
  %v124 = vld [vmem:[%s0 + $0x3a0] sm:$0xff]
  %v125 = vld [vmem:[%s0 + $0x3a8] sm:$0xff]
  %v126 = vld [vmem:[%s0 + $0x3b0] sm:$0xff]
  %v127 = vld [vmem:[%s0 + $0x3b8] sm:$0xff]
  %v128 = vld [vmem:[%s0 + $0x3c0] sm:$0xff]
  %v129 = vld [vmem:[%s0 + $0x3c8] sm:$0xff]
  %v130 = vld [vmem:[%s0 + $0x3d0] sm:$0xff]
  %v131 = vld [vmem:[%s0 + $0x3d8] sm:$0xff]
  %v132 = vld [vmem:[%s0 + $0x3e0] sm:$0xff]
  %v133 = vld [vmem:[%s0 + $0x3e8] sm:$0xff]
  %v134 = vld [vmem:[%s0 + $0x3f0] sm:$0xff]
  %v135 = vld [vmem:[%s0 + $0x3f8] sm:$0xff]
  %v136 = vld [vmem:[%s0 + $0x400] sm:$0xff]
  %v137 = vld [vmem:[%s0 + $0x408] sm:$0xff]
  %v138 = vld [vmem:[%s0 + $0x410] sm:$0xff]
  %v139 = vld [vmem:[%s0 + $0x418] sm:$0xff]
  %v140 = vld [vmem:[%s0 + $0x420] sm:$0x3]
  %v141 = vld [vmem:[%s0 + $0x428] sm:$0xff]
  %v142 = vld [vmem:[%s0 + $0x430] sm:$0xff]
  %v143 = vld [vmem:[%s0 + $0x438] sm:$0xff]
  %v144 = vld [vmem:[%s0 + $0x440] sm:$0xff]
  %v145 = vld [vmem:[%s0 + $0x448] sm:$0xff]
  %v146 = vld [vmem:[%s0 + $0x450] sm:$0xff]
  %v147 = vld [vmem:[%s0 + $0x458] sm:$0xff]
  %v148 = vld [vmem:[%s0 + $0x460] sm:$0xff]
  %v149 = vld [vmem:[%s0 + $0x468] sm:$0xff]
  %v150 = vld [vmem:[%s0 + $0x470] sm:$0xff]
  %v151 = vld [vmem:[%s0 + $0x478] sm:$0xff]
  %v152 = vld [vmem:[%s0 + $0x480] sm:$0xff]
  %v153 = vld [vmem:[%s0 + $0x488] sm:$0xff]
  %v154 = vld [vmem:[%s0 + $0x490] sm:$0xff]
  %v155 = vld [vmem:[%s0 + $0x498] sm:$0xff]
  %v156 = vld [vmem:[%s0 + $0x4a0] sm:$0xff]
  %v157 = vld [vmem:[%s0 + $0x4a8] sm:$0xff]
  %v158 = vld [vmem:[%s0 + $0x4b0] sm:$0xff]
  %v159 = vld [vmem:[%s0 + $0x4b8] sm:$0xff]
  %v160 = vld [vmem:[%s0 + $0x4c0] sm:$0xff]
  %v161 = vld [vmem:[%s0 + $0x4c8] sm:$0xff]
  %v162 = vld [vmem:[%s0 + $0x4d0] sm:$0xff]
  %v163 = vld [vmem:[%s0 + $0x4d8] sm:$0xff]
  %v164 = vld [vmem:[%s0 + $0x4e0] sm:$0xff]
  %v165 = vld [vmem:[%s0 + $0x4e8] sm:$0xff]
  %v166 = vld [vmem:[%s0 + $0x4f0] sm:$0xff]
  %v167 = vld [vmem:[%s0 + $0x4f8] sm:$0xff]
  %v168 = vld [vmem:[%s0 + $0x500] sm:$0xff]
  %v169 = vld [vmem:[%s0 + $0x508] sm:$0xff]
  %v170 = vld [vmem:[%s0 + $0x510] sm:$0xff]
  %v171 = vld [vmem:[%s0 + $0x518] sm:$0xff]
  %v172 = vld [vmem:[%s0 + $0x520] sm:$0xff]
  %v173 = vld [vmem:[%s0 + $0x528] sm:$0xff]
  %v174 = vld [vmem:[%s0 + $0x530] sm:$0xff]
  %v175 = vld [vmem:[%s0 + $0x538] sm:$0xff]
  %v176 = vld [vmem:[%s0 + $0x540] sm:$0xff]
  %v177 = vld [vmem:[%s0 + $0x548] sm:$0xff]
  %v178 = vld [vmem:[%s0 + $0x550] sm:$0xff]
  %v179 = vld [vmem:[%s0 + $0x558] sm:$0xff]
  %v180 = vld [vmem:[%s0 + $0x560] sm:$0xff]
  %v181 = vld [vmem:[%s0 + $0x568] sm:$0xff]
  %v182 = vld [vmem:[%s0 + $0x570] sm:$0xff]
  %v183 = vld [vmem:[%s0 + $0x578] sm:$0xff]
  %v184 = vld [vmem:[%s0 + $0x580] sm:$0xff]
  %v185 = vld [vmem:[%s0 + $0x588] sm:$0xff]
  %v186 = vld [vmem:[%s0 + $0x590] sm:$0xff]
  %v187 = vld [vmem:[%s0 + $0x598] sm:$0xff]
  %v188 = vld [vmem:[%s0 + $0x5a0] sm:$0xff]
  %v189 = vld [vmem:[%s0 + $0x5a8] sm:$0xff]
  %v190 = vld [vmem:[%s0 + $0x5b0] sm:$0xff]
  %v191 = vld [vmem:[%s0 + $0x5b8] sm:$0xff]
  %v192 = vld [vmem:[%s0 + $0x5c0] sm:$0xff]
  %v193 = vld [vmem:[%s0 + $0x5c8] sm:$0xff]
  %v194 = vld [vmem:[%s0 + $0x5d0] sm:$0xff]
  %v195 = vld [vmem:[%s0 + $0x5d8] sm:$0xff]
  %v196 = vld [vmem:[%s0 + $0x5e0] sm:$0xff]
  %v197 = vld [vmem:[%s0 + $0x5e8] sm:$0xff]
  %v198 = vld [vmem:[%s0 + $0x5f0] sm:$0xff]
  %v199 = vld [vmem:[%s0 + $0x5f8] sm:$0xff]
  %v200 = vld [vmem:[%s0 + $0x600] sm:$0xff]
  %v201 = vld [vmem:[%s0 + $0x608] sm:$0xff]
  %v202 = vld [vmem:[%s0 + $0x610] sm:$0xff]
  %v203 = vld [vmem:[%s0 + $0x618] sm:$0xff]
  %v204 = vld [vmem:[%s0 + $0x620] sm:$0xff]
  %v205 = vld [vmem:[%s0 + $0x628] sm:$0xff]
  %v206 = vld [vmem:[%s0 + $0x630] sm:$0xff]
  %v207 = vld [vmem:[%s0 + $0x638] sm:$0xff]
  %v208 = vld [vmem:[%s0 + $0x640] sm:$0xff]
  %v209 = vld [vmem:[%s0 + $0x648] sm:$0xff]
  %v210 = vld [vmem:[%s0 + $0x650] sm:$0xff]
  %v211 = vld [vmem:[%s0 + $0x658] sm:$0xff]
  %v212 = vld [vmem:[%s0 + $0x660] sm:$0xff]
  %v213 = vld [vmem:[%s0 + $0x668] sm:$0xff]
  %v214 = vld [vmem:[%s0 + $0x670] sm:$0xff]
  %v215 = vld [vmem:[%s0 + $0x678] sm:$0xff]
  %v216 = vld [vmem:[%s0 + $0x680] sm:$0xff]
  %v217 = vld [vmem:[%s0 + $0x688] sm:$0xff]
  %v218 = vld [vmem:[%s0 + $0x690] sm:$0xff]
  %v219 = vld [vmem:[%s0 + $0x698] sm:$0xff]
  %v220 = vld [vmem:[%s0 + $0x6a0] sm:$0xff]
  %v221 = vld [vmem:[%s0 + $0x6a8] sm:$0xff]
  %v222 = vld [vmem:[%s0 + $0x6b0] sm:$0xff]
  %v223 = vld [vmem:[%s0 + $0x6b8] sm:$0xff]
  %v224 = vld [vmem:[%s0 + $0x6c0] sm:$0xff]
  %v225 = vld [vmem:[%s0 + $0x6c8] sm:$0xff]
  %v226 = vld [vmem:[%s0 + $0x6d0] sm:$0xff]
  %v227 = vld [vmem:[%s0 + $0x6d8] sm:$0xff]
  %v228 = vld [vmem:[%s0 + $0x6e0] sm:$0xff]
  %v229 = vld [vmem:[%s0 + $0x6e8] sm:$0xff]
  %v230 = vld [vmem:[%s0 + $0x6f0] sm:$0xff]
  %v231 = vld [vmem:[%s0 + $0x6f8] sm:$0xff]
  %v232 = vld [vmem:[%s0 + $0x700] sm:$0xff]
  %v233 = vld [vmem:[%s0 + $0x708] sm:$0xff]
  %v234 = vld [vmem:[%s0 + $0x710] sm:$0xff]
  %v235 = vld [vmem:[%s0 + $0x718] sm:$0xff]
  %v236 = vld [vmem:[%s0 + $0x720] sm:$0xff]
  %v237 = vld [vmem:[%s0 + $0x728] sm:$0xff]
  %v238 = vld [vmem:[%s0 + $0x730] sm:$0xff]
  %v239 = vld [vmem:[%s0 + $0x738] sm:$0xff]
  %v240 = vld [vmem:[%s0 + $0x740] sm:$0xff]
  %v241 = vld [vmem:[%s0 + $0x748] sm:$0xff]
  %v242 = vld [vmem:[%s0 + $0x750] sm:$0xff]
  %v243 = vld [vmem:[%s0 + $0x758] sm:$0xff]
  %v244 = vld [vmem:[%s0 + $0x760] sm:$0xff]
  %v245 = vld [vmem:[%s0 + $0x768] sm:$0xff]
  %v246 = vld [vmem:[%s0 + $0x770] sm:$0xff]
  %v247 = vld [vmem:[%s0 + $0x778] sm:$0xff]
  %v248 = vld [vmem:[%s0 + $0x780] sm:$0xff]
  %v249 = vld [vmem:[%s0 + $0x788] sm:$0xff]
  %v250 = vld [vmem:[%s0 + $0x790] sm:$0xff]
  %v251 = vld [vmem:[%s0 + $0x798] sm:$0xff]
  %v252 = vld [vmem:[%s0 + $0x7a0] sm:$0xff]
  %v253 = vld [vmem:[%s0 + $0x7a8] sm:$0xff]
  %v254 = vld [vmem:[%s0 + $0x7b0] sm:$0xff]
  %v255 = vld [vmem:[%s0 + $0x7b8] sm:$0xff]
  %v256 = vld [vmem:[%s0 + $0x7c0] sm:$0xff]
  %v257 = vld [vmem:[%s0 + $0x7c8] sm:$0xff]
  %v258 = vld [vmem:[%s0 + $0x7d0] sm:$0xff]
  %v259 = vld [vmem:[%s0 + $0x7d8] sm:$0xff]
  %v260 = vld [vmem:[%s0 + $0x7e0] sm:$0xff]
  %v261 = vld [vmem:[%s0 + $0x7e8] sm:$0xff]
  %v262 = vld [vmem:[%s0 + $0x7f0] sm:$0xff]
  %v263 = vld [vmem:[%s0 + $0x7f8] sm:$0xff]
  %v264 = vld [vmem:[%s0 + $0x800] sm:$0xff]
  %v265 = vld [vmem:[%s0 + $0x808] sm:$0xff]
  %v266 = vld [vmem:[%s0 + $0x810] sm:$0xff]
  %v267 = vld [vmem:[%s0 + $0x818] sm:$0xff]
  %v268 = vld [vmem:[%s0 + $0x820] sm:$0xff]
  %v269 = vld [vmem:[%s0 + $0x828] sm:$0xff]
  %v270 = vld [vmem:[%s0 + $0x830] sm:$0xff]
  %v271 = vld [vmem:[%s0 + $0x838] sm:$0xff]
  %v272 = vld [vmem:[%s0 + $0x840] sm:$0xff]
  %v273 = vld [vmem:[%s0 + $0x848] sm:$0x3]
  %v274 = vld [vmem:[%s0 + $0x850] sm:$0xff]
  %v275 = vld [vmem:[%s0 + $0x858] sm:$0xff]
  %v276 = vld [vmem:[%s0 + $0x860] sm:$0xff]
  %v277 = vld [vmem:[%s0 + $0x868] sm:$0xff]
  %v278 = vld [vmem:[%s0 + $0x870] sm:$0xff]
  %v279 = vld [vmem:[%s0 + $0x878] sm:$0xff]
  %v280 = vld [vmem:[%s0 + $0x880] sm:$0xff]
  %v281 = vld [vmem:[%s0 + $0x888] sm:$0xff]
  %v282 = vld [vmem:[%s0 + $0x890] sm:$0xff]
  %v283 = vld [vmem:[%s0 + $0x898] sm:$0xff]
  %v284 = vld [vmem:[%s0 + $0x8a0] sm:$0xff]
  %v285 = vld [vmem:[%s0 + $0x8a8] sm:$0xff]
  %v286 = vld [vmem:[%s0 + $0x8b0] sm:$0xff]
  %v287 = vld [vmem:[%s0 + $0x8b8] sm:$0xff]
  %v288 = vld [vmem:[%s0 + $0x8c0] sm:$0xff]
  %v289 = vld [vmem:[%s0 + $0x8c8] sm:$0xff]
  %v290 = vld [vmem:[%s0 + $0x8d0] sm:$0xff]
  %v291 = vld [vmem:[%s0 + $0x8d8] sm:$0xff]
  %v292 = vld [vmem:[%s0 + $0x8e0] sm:$0xff]
  %v293 = vld [vmem:[%s0 + $0x8e8] sm:$0xff]
  %v294 = vld [vmem:[%s0 + $0x8f0] sm:$0xff]
  %v295 = vld [vmem:[%s0 + $0x8f8] sm:$0xff]
  %v296 = vld [vmem:[%s0 + $0x900] sm:$0xff]
  %v297 = vld [vmem:[%s0 + $0x908] sm:$0xff]
  %v298 = vld [vmem:[%s0 + $0x910] sm:$0xff]
  %v299 = vld [vmem:[%s0 + $0x918] sm:$0xff]
  %v300 = vld [vmem:[%s0 + $0x920] sm:$0xff]
  %v301 = vld [vmem:[%s0 + $0x928] sm:$0xff]
  %v302 = vld [vmem:[%s0 + $0x930] sm:$0xff]
  %v303 = vld [vmem:[%s0 + $0x938] sm:$0xff]
  %v304 = vld [vmem:[%s0 + $0x940] sm:$0xff]
  %v305 = vld [vmem:[%s0 + $0x948] sm:$0xff]
  %v306 = vld [vmem:[%s0 + $0x950] sm:$0xff]
  %v307 = vld [vmem:[%s0 + $0x958] sm:$0xff]
  %v308 = vld [vmem:[%s0 + $0x960] sm:$0xff]
  %v309 = vld [vmem:[%s0 + $0x968] sm:$0xff]
  %v310 = vld [vmem:[%s0 + $0x970] sm:$0xff]
  %v311 = vld [vmem:[%s0 + $0x978] sm:$0xff]
  %v312 = vld [vmem:[%s0 + $0x980] sm:$0xff]
  %v313 = vld [vmem:[%s0 + $0x988] sm:$0xff]
  %v314 = vld [vmem:[%s0 + $0x990] sm:$0xff]
  %v315 = vld [vmem:[%s0 + $0x998] sm:$0xff]
  %v316 = vld [vmem:[%s0 + $0x9a0] sm:$0xff]
  %v317 = vld [vmem:[%s0 + $0x9a8] sm:$0xff]
  %v318 = vld [vmem:[%s0 + $0x9b0] sm:$0xff]
  %v319 = vld [vmem:[%s0 + $0x9b8] sm:$0xff]
  %v320 = vld [vmem:[%s0 + $0x9c0] sm:$0xff]
  %v321 = vld [vmem:[%s0 + $0x9c8] sm:$0xff]
  %v322 = vld [vmem:[%s0 + $0x9d0] sm:$0xff]
  %v323 = vld [vmem:[%s0 + $0x9d8] sm:$0xff]
  %v324 = vld [vmem:[%s0 + $0x9e0] sm:$0xff]
  %v325 = vld [vmem:[%s0 + $0x9e8] sm:$0xff]
  %v326 = vld [vmem:[%s0 + $0x9f0] sm:$0xff]
  %v327 = vld [vmem:[%s0 + $0x9f8] sm:$0xff]
  %v328 = vld [vmem:[%s0 + $0xa00] sm:$0xff]
  %v329 = vld [vmem:[%s0 + $0xa08] sm:$0xff]
  %v330 = vld [vmem:[%s0 + $0xa10] sm:$0xff]
  %v331 = vld [vmem:[%s0 + $0xa18] sm:$0xff]
  %v332 = vld [vmem:[%s0 + $0xa20] sm:$0xff]
  %v333 = vld [vmem:[%s0 + $0xa28] sm:$0xff]
  %v334 = vld [vmem:[%s0 + $0xa30] sm:$0xff]
  %v335 = vld [vmem:[%s0 + $0xa38] sm:$0xff]
  %v336 = vld [vmem:[%s0 + $0xa40] sm:$0xff]
  %v337 = vld [vmem:[%s0 + $0xa48] sm:$0xff]
  %v338 = vld [vmem:[%s0 + $0xa50] sm:$0xff]
  %v339 = vld [vmem:[%s0 + $0xa58] sm:$0xff]
  %v340 = vld [vmem:[%s0 + $0xa60] sm:$0xff]
  %v341 = vld [vmem:[%s0 + $0xa68] sm:$0xff]
  %v342 = vld [vmem:[%s0 + $0xa70] sm:$0xff]
  %v343 = vld [vmem:[%s0 + $0xa78] sm:$0xff]
  %v344 = vld [vmem:[%s0 + $0xa80] sm:$0xff]
  %v345 = vld [vmem:[%s0 + $0xa88] sm:$0xff]
  %v346 = vld [vmem:[%s0 + $0xa90] sm:$0xff]
  %v347 = vld [vmem:[%s0 + $0xa98] sm:$0xff]
  %v348 = vld [vmem:[%s0 + $0xaa0] sm:$0xff]
  %v349 = vld [vmem:[%s0 + $0xaa8] sm:$0xff]
  %v350 = vld [vmem:[%s0 + $0xab0] sm:$0xff]
  %v351 = vld [vmem:[%s0 + $0xab8] sm:$0xff]
  %v352 = vld [vmem:[%s0 + $0xac0] sm:$0xff]
  %v353 = vld [vmem:[%s0 + $0xac8] sm:$0xff]
  %v354 = vld [vmem:[%s0 + $0xad0] sm:$0xff]
  %v355 = vld [vmem:[%s0 + $0xad8] sm:$0xff]
  %v356 = vld [vmem:[%s0 + $0xae0] sm:$0xff]
  %v357 = vld [vmem:[%s0 + $0xae8] sm:$0xff]
  %v358 = vld [vmem:[%s0 + $0xaf0] sm:$0xff]
  %v359 = vld [vmem:[%s0 + $0xaf8] sm:$0xff]
  %v360 = vld [vmem:[%s0 + $0xb00] sm:$0xff]
  %v361 = vld [vmem:[%s0 + $0xb08] sm:$0xff]
  %v362 = vld [vmem:[%s0 + $0xb10] sm:$0xff]
  %v363 = vld [vmem:[%s0 + $0xb18] sm:$0xff]
  %v364 = vld [vmem:[%s0 + $0xb20] sm:$0xff]
  %v365 = vld [vmem:[%s0 + $0xb28] sm:$0xff]
  %v366 = vld [vmem:[%s0 + $0xb30] sm:$0xff]
  %v367 = vld [vmem:[%s0 + $0xb38] sm:$0xff]
  %v368 = vld [vmem:[%s0 + $0xb40] sm:$0xff]
  %v369 = vld [vmem:[%s0 + $0xb48] sm:$0xff]
  %v370 = vld [vmem:[%s0 + $0xb50] sm:$0xff]
  %v371 = vld [vmem:[%s0 + $0xb58] sm:$0xff]
  %v372 = vld [vmem:[%s0 + $0xb60] sm:$0xff]
  %v373 = vld [vmem:[%s0 + $0xb68] sm:$0xff]
  %v374 = vld [vmem:[%s0 + $0xb70] sm:$0xff]
  %v375 = vld [vmem:[%s0 + $0xb78] sm:$0xff]
  %v376 = vld [vmem:[%s0 + $0xb80] sm:$0xff]
  %v377 = vld [vmem:[%s0 + $0xb88] sm:$0xff]
  %v378 = vld [vmem:[%s0 + $0xb90] sm:$0xff]
  %v379 = vld [vmem:[%s0 + $0xb98] sm:$0xff]
  %v380 = vld [vmem:[%s0 + $0xba0] sm:$0xff]
  %v381 = vld [vmem:[%s0 + $0xba8] sm:$0xff]
  %v382 = vld [vmem:[%s0 + $0xbb0] sm:$0xff]
  %v383 = vld [vmem:[%s0 + $0xbb8] sm:$0xff]
  %v384 = vld [vmem:[%s0 + $0xbc0] sm:$0xff]
  %v385 = vld [vmem:[%s0 + $0xbc8] sm:$0xff]
  %v386 = vld [vmem:[%s0 + $0xbd0] sm:$0xff]
  %v387 = vld [vmem:[%s0 + $0xbd8] sm:$0xff]
  %v388 = vld [vmem:[%s0 + $0xbe0] sm:$0xff]
  %v389 = vld [vmem:[%s0 + $0xbe8] sm:$0xff]
  %v390 = vld [vmem:[%s0 + $0xbf0] sm:$0xff]
  %v391 = vld [vmem:[%s0 + $0xbf8] sm:$0xff]
  %v392 = vld [vmem:[%s0 + $0xc00] sm:$0xff]
  %v393 = vld [vmem:[%s0 + $0xc08] sm:$0xff]
  %v394 = vld [vmem:[%s0 + $0xc10] sm:$0xff]
  %v395 = vld [vmem:[%s0 + $0xc18] sm:$0xff]
  %v396 = vld [vmem:[%s0 + $0xc20] sm:$0xff]
  %v397 = vld [vmem:[%s0 + $0xc28] sm:$0xff]
  %v398 = vld [vmem:[%s0 + $0xc30] sm:$0xff]
  %v399 = vld [vmem:[%s0 + $0xc38] sm:$0xff]
  %v400 = vld [vmem:[%s0 + $0xc40] sm:$0xff]
  %v401 = vld [vmem:[%s0 + $0xc48] sm:$0xff]
  %v402 = vld [vmem:[%s0 + $0xc50] sm:$0xff]
  %v403 = vld [vmem:[%s0 + $0xc58] sm:$0xff]
  %v404 = vld [vmem:[%s0 + $0xc60] sm:$0xff]
  %v405 = vld [vmem:[%s0 + $0xc68] sm:$0xff]
  %v406 = vld [vmem:[%s0 + $0xc70] sm:$0x3]
  %v407 = vld [vmem:[%s0 + $0xc78] sm:$0xff]
  %v408 = vld [vmem:[%s0 + $0xc80] sm:$0xff]
  %v409 = vld [vmem:[%s0 + $0xc88] sm:$0xff]
  %v410 = vld [vmem:[%s0 + $0xc90] sm:$0xff]
  %v411 = vld [vmem:[%s0 + $0xc98] sm:$0xff]
  %v412 = vld [vmem:[%s0 + $0xca0] sm:$0xff]
  %v413 = vld [vmem:[%s0 + $0xca8] sm:$0xff]
  %v414 = vld [vmem:[%s0 + $0xcb0] sm:$0xff]
  %v415 = vld [vmem:[%s0 + $0xcb8] sm:$0xff]
  %v416 = vld [vmem:[%s0 + $0xcc0] sm:$0xff]
  %v417 = vld [vmem:[%s0 + $0xcc8] sm:$0xff]
  %v418 = vld [vmem:[%s0 + $0xcd0] sm:$0xff]
  %v419 = vld [vmem:[%s0 + $0xcd8] sm:$0xff]
  %v420 = vld [vmem:[%s0 + $0xce0] sm:$0xff]
  %v421 = vld [vmem:[%s0 + $0xce8] sm:$0xff]
  %v422 = vld [vmem:[%s0 + $0xcf0] sm:$0xff]
  %v423 = vld [vmem:[%s0 + $0xcf8] sm:$0xff]
  %v424 = vld [vmem:[%s0 + $0xd00] sm:$0xff]
  %v425 = vld [vmem:[%s0 + $0xd08] sm:$0xff]
  %v426 = vld [vmem:[%s0 + $0xd10] sm:$0xff]
  %v427 = vld [vmem:[%s0 + $0xd18] sm:$0xff]
  %v428 = vld [vmem:[%s0 + $0xd20] sm:$0xff]
  %v429 = vld [vmem:[%s0 + $0xd28] sm:$0xff]
  %v430 = vld [vmem:[%s0 + $0xd30] sm:$0xff]
  %v431 = vld [vmem:[%s0 + $0xd38] sm:$0xff]
  %v432 = vld [vmem:[%s0 + $0xd40] sm:$0xff]
  %v433 = vld [vmem:[%s0 + $0xd48] sm:$0xff]
  %v434 = vld [vmem:[%s0 + $0xd50] sm:$0xff]
  %v435 = vld [vmem:[%s0 + $0xd58] sm:$0xff]
  %v436 = vld [vmem:[%s0 + $0xd60] sm:$0xff]
  %v437 = vld [vmem:[%s0 + $0xd68] sm:$0xff]
  %v438 = vld [vmem:[%s0 + $0xd70] sm:$0xff]
  %v439 = vld [vmem:[%s0 + $0xd78] sm:$0xff]
  %v440 = vld [vmem:[%s0 + $0xd80] sm:$0xff]
  %v441 = vld [vmem:[%s0 + $0xd88] sm:$0xff]
  %v442 = vld [vmem:[%s0 + $0xd90] sm:$0xff]
  %v443 = vld [vmem:[%s0 + $0xd98] sm:$0xff]
  %v444 = vld [vmem:[%s0 + $0xda0] sm:$0xff]
  %v445 = vld [vmem:[%s0 + $0xda8] sm:$0xff]
  %v446 = vld [vmem:[%s0 + $0xdb0] sm:$0xff]
  %v447 = vld [vmem:[%s0 + $0xdb8] sm:$0xff]
  %v448 = vld [vmem:[%s0 + $0xdc0] sm:$0xff]
  %v449 = vld [vmem:[%s0 + $0xdc8] sm:$0xff]
  %v450 = vld [vmem:[%s0 + $0xdd0] sm:$0xff]
  %v451 = vld [vmem:[%s0 + $0xdd8] sm:$0xff]
  %v452 = vld [vmem:[%s0 + $0xde0] sm:$0xff]
  %v453 = vld [vmem:[%s0 + $0xde8] sm:$0xff]
  %v454 = vld [vmem:[%s0 + $0xdf0] sm:$0xff]
  %v455 = vld [vmem:[%s0 + $0xdf8] sm:$0xff]
  %v456 = vld [vmem:[%s0 + $0xe00] sm:$0xff]
  %v457 = vld [vmem:[%s0 + $0xe08] sm:$0xff]
  %v458 = vld [vmem:[%s0 + $0xe10] sm:$0xff]
  %v459 = vld [vmem:[%s0 + $0xe18] sm:$0xff]
  %v460 = vld [vmem:[%s0 + $0xe20] sm:$0xff]
  %v461 = vld [vmem:[%s0 + $0xe28] sm:$0xff]
  %v462 = vld [vmem:[%s0 + $0xe30] sm:$0xff]
  %v463 = vld [vmem:[%s0 + $0xe38] sm:$0xff]
  %v464 = vld [vmem:[%s0 + $0xe40] sm:$0xff]
  %v465 = vld [vmem:[%s0 + $0xe48] sm:$0xff]
  %v466 = vld [vmem:[%s0 + $0xe50] sm:$0xff]
  %v467 = vld [vmem:[%s0 + $0xe58] sm:$0xff]
  %v468 = vld [vmem:[%s0 + $0xe60] sm:$0xff]
  %v469 = vld [vmem:[%s0 + $0xe68] sm:$0xff]
  %v470 = vld [vmem:[%s0 + $0xe70] sm:$0xff]
  %v471 = vld [vmem:[%s0 + $0xe78] sm:$0xff]
  %v472 = vld [vmem:[%s0 + $0xe80] sm:$0xff]
  %v473 = vld [vmem:[%s0 + $0xe88] sm:$0xff]
  %v474 = vld [vmem:[%s0 + $0xe90] sm:$0xff]
  %v475 = vld [vmem:[%s0 + $0xe98] sm:$0xff]
  %v476 = vld [vmem:[%s0 + $0xea0] sm:$0xff]
  %v477 = vld [vmem:[%s0 + $0xea8] sm:$0xff]
  %v478 = vld [vmem:[%s0 + $0xeb0] sm:$0xff]
  %v479 = vld [vmem:[%s0 + $0xeb8] sm:$0xff]
  %v480 = vld [vmem:[%s0 + $0xec0] sm:$0xff]
  %v481 = vld [vmem:[%s0 + $0xec8] sm:$0xff]
  %v482 = vld [vmem:[%s0 + $0xed0] sm:$0xff]
  %v483 = vld [vmem:[%s0 + $0xed8] sm:$0xff]
  %v484 = vld [vmem:[%s0 + $0xee0] sm:$0xff]
  %v485 = vld [vmem:[%s0 + $0xee8] sm:$0xff]
  %v486 = vld [vmem:[%s0 + $0xef0] sm:$0xff]
  %v487 = vld [vmem:[%s0 + $0xef8] sm:$0xff]
  %v488 = vld [vmem:[%s0 + $0xf00] sm:$0xff]
  %v489 = vld [vmem:[%s0 + $0xf08] sm:$0xff]
  %v490 = vld [vmem:[%s0 + $0xf10] sm:$0xff]
  %v491 = vld [vmem:[%s0 + $0xf18] sm:$0xff]
  %v492 = vld [vmem:[%s0 + $0xf20] sm:$0xff]
  %v493 = vld [vmem:[%s0 + $0xf28] sm:$0xff]
  %v494 = vld [vmem:[%s0 + $0xf30] sm:$0xff]
  %v495 = vld [vmem:[%s0 + $0xf38] sm:$0xff]
  %v496 = vld [vmem:[%s0 + $0xf40] sm:$0xff]
  %v497 = vld [vmem:[%s0 + $0xf48] sm:$0xff]
  %v498 = vld [vmem:[%s0 + $0xf50] sm:$0xff]
  %v499 = vld [vmem:[%s0 + $0xf58] sm:$0xff]
  %v500 = vld [vmem:[%s0 + $0xf60] sm:$0xff]
  %v501 = vld [vmem:[%s0 + $0xf68] sm:$0xff]
  %v502 = vld [vmem:[%s0 + $0xf70] sm:$0xff]
  %v503 = vld [vmem:[%s0 + $0xf78] sm:$0xff]
  %v504 = vld [vmem:[%s0 + $0xf80] sm:$0xff]
  %v505 = vld [vmem:[%s0 + $0xf88] sm:$0xff]
  %v506 = vld [vmem:[%s0 + $0xf90] sm:$0xff]
  %v507 = vld [vmem:[%s0 + $0xf98] sm:$0xff]
  %v508 = vld [vmem:[%s0 + $0xfa0] sm:$0xff]
  %v509 = vld [vmem:[%s0 + $0xfa8] sm:$0xff]
  %v510 = vld [vmem:[%s0 + $0xfb0] sm:$0xff]
  %v511 = vld [vmem:[%s0 + $0xfb8] sm:$0xff]
  %v512 = vld [vmem:[%s0 + $0xfc0] sm:$0xff]
  %v513 = vld [vmem:[%s0 + $0xfc8] sm:$0xff]
  %v514 = vld [vmem:[%s0 + $0xfd0] sm:$0xff]
  %v515 = vld [vmem:[%s0 + $0xfd8] sm:$0xff]
  %v516 = vld [vmem:[%s0 + $0xfe0] sm:$0xff]
  %v517 = vld [vmem:[%s0 + $0xfe8] sm:$0xff]
  %v518 = vld [vmem:[%s0 + $0xff0] sm:$0xff]
  %v519 = vld [vmem:[%s0 + $0xff8] sm:$0xff]
  %v520 = vld [vmem:[%s0 + $0x1000] sm:$0xff]
  %v521 = vld [vmem:[%s0 + $0x1008] sm:$0xff]
  %v522 = vld [vmem:[%s0 + $0x1010] sm:$0xff]
  %v523 = vld [vmem:[%s0 + $0x1018] sm:$0xff]
  %v524 = vld [vmem:[%s0 + $0x1020] sm:$0xff]
  %v525 = vld [vmem:[%s0 + $0x1028] sm:$0xff]
  %v526 = vld [vmem:[%s0 + $0x1030] sm:$0xff]
  %v527 = vld [vmem:[%s0 + $0x1038] sm:$0xff]
  %v528 = vld [vmem:[%s0 + $0x1040] sm:$0xff]
  %v529 = vld [vmem:[%s0 + $0x1048] sm:$0xff]
  %v530 = vld [vmem:[%s0 + $0x1050] sm:$0xff]
  %v531 = vld [vmem:[%s0 + $0x1058] sm:$0xff]
  %v532 = vld [vmem:[%s0 + $0x1060] sm:$0xff]
  %v533 = vld [vmem:[%s0 + $0x1068] sm:$0xff]
  %v534 = vld [vmem:[%s0 + $0x1070] sm:$0xff]
  %v535 = vld [vmem:[%s0 + $0x1078] sm:$0xff]
  %v536 = vld [vmem:[%s0 + $0x1080] sm:$0xff]
  %v537 = vld [vmem:[%s0 + $0x1088] sm:$0xff]
  %v538 = vld [vmem:[%s0 + $0x1090] sm:$0xff]
  %v539 = vld [vmem:[%s0 + $0x1098] sm:$0x3]
  %v540 = vld [vmem:[%s0 + $0x10a0] sm:$0xff]
  %v541 = vld [vmem:[%s0 + $0x10a8] sm:$0xff]
  %v542 = vld [vmem:[%s0 + $0x10b0] sm:$0xff]
  %v543 = vld [vmem:[%s0 + $0x10b8] sm:$0xff]
  %v544 = vld [vmem:[%s0 + $0x10c0] sm:$0xff]
  %v545 = vld [vmem:[%s0 + $0x10c8] sm:$0xff]
  %v546 = vld [vmem:[%s0 + $0x10d0] sm:$0xff]
  %v547 = vld [vmem:[%s0 + $0x10d8] sm:$0xff]
  %v548 = vld [vmem:[%s0 + $0x10e0] sm:$0xff]
  %v549 = vld [vmem:[%s0 + $0x10e8] sm:$0xff]
  %v550 = vld [vmem:[%s0 + $0x10f0] sm:$0xff]
  %v551 = vld [vmem:[%s0 + $0x10f8] sm:$0xff]
  %v552 = vld [vmem:[%s0 + $0x1100] sm:$0xff]
  %v553 = vld [vmem:[%s0 + $0x1108] sm:$0xff]
  %v554 = vld [vmem:[%s0 + $0x1110] sm:$0xff]
  %v555 = vld [vmem:[%s0 + $0x1118] sm:$0xff]
  %v556 = vld [vmem:[%s0 + $0x1120] sm:$0xff]
  %v557 = vld [vmem:[%s0 + $0x1128] sm:$0xff]
  %v558 = vld [vmem:[%s0 + $0x1130] sm:$0xff]
  %v559 = vld [vmem:[%s0 + $0x1138] sm:$0xff]
  %v560 = vld [vmem:[%s0 + $0x1140] sm:$0xff]
  %v561 = vld [vmem:[%s0 + $0x1148] sm:$0xff]
  %v562 = vld [vmem:[%s0 + $0x1150] sm:$0xff]
  %v563 = vld [vmem:[%s0 + $0x1158] sm:$0xff]
  %v564 = vld [vmem:[%s0 + $0x1160] sm:$0xff]
  %v565 = vld [vmem:[%s0 + $0x1168] sm:$0xff]
  %v566 = vld [vmem:[%s0 + $0x1170] sm:$0xff]
  %v567 = vld [vmem:[%s0 + $0x1178] sm:$0xff]
  %v568 = vld [vmem:[%s0 + $0x1180] sm:$0xff]
  %v569 = vld [vmem:[%s0 + $0x1188] sm:$0xff]
  %v570 = vld [vmem:[%s0 + $0x1190] sm:$0xff]
  %v571 = vld [vmem:[%s0 + $0x1198] sm:$0xff]
  %v572 = vld [vmem:[%s0 + $0x11a0] sm:$0xff]
  %v573 = vld [vmem:[%s0 + $0x11a8] sm:$0xff]
  %v574 = vld [vmem:[%s0 + $0x11b0] sm:$0xff]
  %v575 = vld [vmem:[%s0 + $0x11b8] sm:$0xff]
  %v576 = vld [vmem:[%s0 + $0x11c0] sm:$0xff]
  %v577 = vld [vmem:[%s0 + $0x11c8] sm:$0xff]
  %v578 = vld [vmem:[%s0 + $0x11d0] sm:$0xff]
  %v579 = vld [vmem:[%s0 + $0x11d8] sm:$0xff]
  %v580 = vld [vmem:[%s0 + $0x11e0] sm:$0xff]
  %v581 = vld [vmem:[%s0 + $0x11e8] sm:$0xff]
  %v582 = vld [vmem:[%s0 + $0x11f0] sm:$0xff]
  %v583 = vld [vmem:[%s0 + $0x11f8] sm:$0xff]
  %v584 = vld [vmem:[%s0 + $0x1200] sm:$0xff]
  %v585 = vld [vmem:[%s0 + $0x1208] sm:$0xff]
  %v586 = vld [vmem:[%s0 + $0x1210] sm:$0xff]
  %v587 = vld [vmem:[%s0 + $0x1218] sm:$0xff]
  %v588 = vld [vmem:[%s0 + $0x1220] sm:$0xff]
  %v589 = vld [vmem:[%s0 + $0x1228] sm:$0xff]
  %v590 = vld [vmem:[%s0 + $0x1230] sm:$0xff]
  %v591 = vld [vmem:[%s0 + $0x1238] sm:$0xff]
  %v592 = vld [vmem:[%s0 + $0x1240] sm:$0xff]
  %v593 = vld [vmem:[%s0 + $0x1248] sm:$0xff]
  %v594 = vld [vmem:[%s0 + $0x1250] sm:$0xff]
  %v595 = vld [vmem:[%s0 + $0x1258] sm:$0xff]
  %v596 = vld [vmem:[%s0 + $0x1260] sm:$0xff]
  %v597 = vld [vmem:[%s0 + $0x1268] sm:$0xff]
  %v598 = vld [vmem:[%s0 + $0x1270] sm:$0xff]
  %v599 = vld [vmem:[%s0 + $0x1278] sm:$0xff]
  %v600 = vld [vmem:[%s0 + $0x1280] sm:$0xff]
  %v601 = vld [vmem:[%s0 + $0x1288] sm:$0xff]
  %v602 = vld [vmem:[%s0 + $0x1290] sm:$0xff]
  %v603 = vld [vmem:[%s0 + $0x1298] sm:$0xff]
  %v604 = vld [vmem:[%s0 + $0x12a0] sm:$0xff]
  %v605 = vld [vmem:[%s0 + $0x12a8] sm:$0xff]
  %v606 = vld [vmem:[%s0 + $0x12b0] sm:$0xff]
  %v607 = vld [vmem:[%s0 + $0x12b8] sm:$0xff]
  %v608 = vld [vmem:[%s0 + $0x12c0] sm:$0xff]
  %v609 = vld [vmem:[%s0 + $0x12c8] sm:$0xff]
  %v610 = vld [vmem:[%s0 + $0x12d0] sm:$0xff]
  %v611 = vld [vmem:[%s0 + $0x12d8] sm:$0xff]
  %v612 = vld [vmem:[%s0 + $0x12e0] sm:$0xff]
  %v613 = vld [vmem:[%s0 + $0x12e8] sm:$0xff]
  %v614 = vld [vmem:[%s0 + $0x12f0] sm:$0xff]
  %v615 = vld [vmem:[%s0 + $0x12f8] sm:$0xff]
  %v616 = vld [vmem:[%s0 + $0x1300] sm:$0xff]
  %v617 = vld [vmem:[%s0 + $0x1308] sm:$0xff]
  %v618 = vld [vmem:[%s0 + $0x1310] sm:$0xff]
  %v619 = vld [vmem:[%s0 + $0x1318] sm:$0xff]
  %v620 = vld [vmem:[%s0 + $0x1320] sm:$0xff]
  %v621 = vld [vmem:[%s0 + $0x1328] sm:$0xff]
  %v622 = vld [vmem:[%s0 + $0x1330] sm:$0xff]
  %v623 = vld [vmem:[%s0 + $0x1338] sm:$0xff]
  %v624 = vld [vmem:[%s0 + $0x1340] sm:$0xff]
  %v625 = vld [vmem:[%s0 + $0x1348] sm:$0xff]
  %v626 = vld [vmem:[%s0 + $0x1350] sm:$0xff]
  %v627 = vld [vmem:[%s0 + $0x1358] sm:$0xff]
  %v628 = vld [vmem:[%s0 + $0x1360] sm:$0xff]
  %v629 = vld [vmem:[%s0 + $0x1368] sm:$0xff]
  %v630 = vld [vmem:[%s0 + $0x1370] sm:$0xff]
  %v631 = vld [vmem:[%s0 + $0x1378] sm:$0xff]
  %v632 = vld [vmem:[%s0 + $0x1380] sm:$0xff]
  %v633 = vld [vmem:[%s0 + $0x1388] sm:$0xff]
  %v634 = vld [vmem:[%s0 + $0x1390] sm:$0xff]
  %v635 = vld [vmem:[%s0 + $0x1398] sm:$0xff]
  %v636 = vld [vmem:[%s0 + $0x13a0] sm:$0xff]
  %v637 = vld [vmem:[%s0 + $0x13a8] sm:$0xff]
  %v638 = vld [vmem:[%s0 + $0x13b0] sm:$0xff]
  %v639 = vld [vmem:[%s0 + $0x13b8] sm:$0xff]
  %v640 = vld [vmem:[%s0 + $0x13c0] sm:$0xff]
  %v641 = vld [vmem:[%s0 + $0x13c8] sm:$0xff]
  %v642 = vld [vmem:[%s0 + $0x13d0] sm:$0xff]
  %v643 = vld [vmem:[%s0 + $0x13d8] sm:$0xff]
  %v644 = vld [vmem:[%s0 + $0x13e0] sm:$0xff]
  %v645 = vld [vmem:[%s0 + $0x13e8] sm:$0xff]
  %v646 = vld [vmem:[%s0 + $0x13f0] sm:$0xff]
  %v647 = vld [vmem:[%s0 + $0x13f8] sm:$0xff]
  %v648 = vld [vmem:[%s0 + $0x1400] sm:$0xff]
  %v649 = vld [vmem:[%s0 + $0x1408] sm:$0xff]
  %v650 = vld [vmem:[%s0 + $0x1410] sm:$0xff]
  %v651 = vld [vmem:[%s0 + $0x1418] sm:$0xff]
  %v652 = vld [vmem:[%s0 + $0x1420] sm:$0xff]
  %v653 = vld [vmem:[%s0 + $0x1428] sm:$0xff]
  %v654 = vld [vmem:[%s0 + $0x1430] sm:$0xff]
  %v655 = vld [vmem:[%s0 + $0x1438] sm:$0xff]
  %v656 = vld [vmem:[%s0 + $0x1440] sm:$0xff]
  %v657 = vld [vmem:[%s0 + $0x1448] sm:$0xff]
  %v658 = vld [vmem:[%s0 + $0x1450] sm:$0xff]
  %v659 = vld [vmem:[%s0 + $0x1458] sm:$0xff]
  %v660 = vld [vmem:[%s0 + $0x1460] sm:$0xff]
  %v661 = vld [vmem:[%s0 + $0x1468] sm:$0xff]
  %v662 = vld [vmem:[%s0 + $0x1470] sm:$0xff]
  %v663 = vld [vmem:[%s0 + $0x1478] sm:$0xff]
  %v664 = vld [vmem:[%s0 + $0x1480] sm:$0xff]
  %v665 = vld [vmem:[%s0 + $0x1488] sm:$0xff]
  %v666 = vld [vmem:[%s0 + $0x1490] sm:$0xff]
  %v667 = vld [vmem:[%s0 + $0x1498] sm:$0xff]
  %v668 = vld [vmem:[%s0 + $0x14a0] sm:$0xff]
  %v669 = vld [vmem:[%s0 + $0x14a8] sm:$0xff]
  %v670 = vld [vmem:[%s0 + $0x14b0] sm:$0xff]
  %v671 = vld [vmem:[%s0 + $0x14b8] sm:$0xff]
  %v672 = vld [vmem:[%s0 + $0x14c0] sm:$0x3]
  %v673 = vld [vmem:[%s0 + $0x14c8] sm:$0xff]
  %v674 = vld [vmem:[%s0 + $0x14d0] sm:$0xff]
  %v675 = vld [vmem:[%s0 + $0x14d8] sm:$0xff]
  %v676 = vld [vmem:[%s0 + $0x14e0] sm:$0xff]
  %v677 = vld [vmem:[%s0 + $0x14e8] sm:$0xff]
  %v678 = vld [vmem:[%s0 + $0x14f0] sm:$0xff]
  %v679 = vld [vmem:[%s0 + $0x14f8] sm:$0xff]
  %v680 = vld [vmem:[%s0 + $0x1500] sm:$0xff]
  %v681 = vld [vmem:[%s0 + $0x1508] sm:$0xff]
  %v682 = vld [vmem:[%s0 + $0x1510] sm:$0xff]
  %v683 = vld [vmem:[%s0 + $0x1518] sm:$0xff]
  %v684 = vld [vmem:[%s0 + $0x1520] sm:$0xff]
  %v685 = vld [vmem:[%s0 + $0x1528] sm:$0xff]
  %v686 = vld [vmem:[%s0 + $0x1530] sm:$0xff]
  %v687 = vld [vmem:[%s0 + $0x1538] sm:$0xff]
  %v688 = vld [vmem:[%s0 + $0x1540] sm:$0xff]
  %v689 = vld [vmem:[%s0 + $0x1548] sm:$0xff]
  %v690 = vld [vmem:[%s0 + $0x1550] sm:$0xff]
  %v691 = vld [vmem:[%s0 + $0x1558] sm:$0xff]
  %v692 = vld [vmem:[%s0 + $0x1560] sm:$0xff]
  %v693 = vld [vmem:[%s0 + $0x1568] sm:$0xff]
  %v694 = vld [vmem:[%s0 + $0x1570] sm:$0xff]
  %v695 = vld [vmem:[%s0 + $0x1578] sm:$0xff]
  %v696 = vld [vmem:[%s0 + $0x1580] sm:$0xff]
  %v697 = vld [vmem:[%s0 + $0x1588] sm:$0xff]
  %v698 = vld [vmem:[%s0 + $0x1590] sm:$0xff]
  %v699 = vld [vmem:[%s0 + $0x1598] sm:$0xff]
  %v700 = vld [vmem:[%s0 + $0x15a0] sm:$0xff]
  %v701 = vld [vmem:[%s0 + $0x15a8] sm:$0xff]
  %v702 = vld [vmem:[%s0 + $0x15b0] sm:$0xff]
  %v703 = vld [vmem:[%s0 + $0x15b8] sm:$0xff]
  %v704 = vld [vmem:[%s0 + $0x15c0] sm:$0xff]
  %v705 = vld [vmem:[%s0 + $0x15c8] sm:$0xff]
  %v706 = vld [vmem:[%s0 + $0x15d0] sm:$0xff]
  %v707 = vld [vmem:[%s0 + $0x15d8] sm:$0xff]
  %v708 = vld [vmem:[%s0 + $0x15e0] sm:$0xff]
  %v709 = vld [vmem:[%s0 + $0x15e8] sm:$0xff]
  %v710 = vld [vmem:[%s0 + $0x15f0] sm:$0xff]
  %v711 = vld [vmem:[%s0 + $0x15f8] sm:$0xff]
  %v712 = vld [vmem:[%s0 + $0x1600] sm:$0xff]
  %v713 = vld [vmem:[%s0 + $0x1608] sm:$0xff]
  %v714 = vld [vmem:[%s0 + $0x1610] sm:$0xff]
  %v715 = vld [vmem:[%s0 + $0x1618] sm:$0xff]
  %v716 = vld [vmem:[%s0 + $0x1620] sm:$0xff]
  %v717 = vld [vmem:[%s0 + $0x1628] sm:$0xff]
  %v718 = vld [vmem:[%s0 + $0x1630] sm:$0xff]
  %v719 = vld [vmem:[%s0 + $0x1638] sm:$0xff]
  %v720 = vld [vmem:[%s0 + $0x1640] sm:$0xff]
  %v721 = vld [vmem:[%s0 + $0x1648] sm:$0xff]
  %v722 = vld [vmem:[%s0 + $0x1650] sm:$0xff]
  %v723 = vld [vmem:[%s0 + $0x1658] sm:$0xff]
  %v724 = vld [vmem:[%s0 + $0x1660] sm:$0xff]
  %v725 = vld [vmem:[%s0 + $0x1668] sm:$0xff]
  %v726 = vld [vmem:[%s0 + $0x1670] sm:$0xff]
  %v727 = vld [vmem:[%s0 + $0x1678] sm:$0xff]
  %v728 = vld [vmem:[%s0 + $0x1680] sm:$0xff]
  %v729 = vld [vmem:[%s0 + $0x1688] sm:$0xff]
  %v730 = vld [vmem:[%s0 + $0x1690] sm:$0xff]
  %v731 = vld [vmem:[%s0 + $0x1698] sm:$0xff]
  %v732 = vld [vmem:[%s0 + $0x16a0] sm:$0xff]
  %v733 = vld [vmem:[%s0 + $0x16a8] sm:$0xff]
  %v734 = vld [vmem:[%s0 + $0x16b0] sm:$0xff]
  %v735 = vld [vmem:[%s0 + $0x16b8] sm:$0xff]
  %v736 = vld [vmem:[%s0 + $0x16c0] sm:$0xff]
  %v737 = vld [vmem:[%s0 + $0x16c8] sm:$0xff]
  %v738 = vld [vmem:[%s0 + $0x16d0] sm:$0xff]
  %v739 = vld [vmem:[%s0 + $0x16d8] sm:$0xff]
  %v740 = vld [vmem:[%s0 + $0x16e0] sm:$0xff]
  %v741 = vld [vmem:[%s0 + $0x16e8] sm:$0xff]
  %v742 = vld [vmem:[%s0 + $0x16f0] sm:$0xff]
  %v743 = vld [vmem:[%s0 + $0x16f8] sm:$0xff]
  %v744 = vld [vmem:[%s0 + $0x1700] sm:$0xff]
  %v745 = vld [vmem:[%s0 + $0x1708] sm:$0xff]
  %v746 = vld [vmem:[%s0 + $0x1710] sm:$0xff]
  %v747 = vld [vmem:[%s0 + $0x1718] sm:$0xff]
  %v748 = vld [vmem:[%s0 + $0x1720] sm:$0xff]
  %v749 = vld [vmem:[%s0 + $0x1728] sm:$0xff]
  %v750 = vld [vmem:[%s0 + $0x1730] sm:$0xff]
  %v751 = vld [vmem:[%s0 + $0x1738] sm:$0xff]
  %v752 = vld [vmem:[%s0 + $0x1740] sm:$0xff]
  %v753 = vld [vmem:[%s0 + $0x1748] sm:$0xff]
  %v754 = vld [vmem:[%s0 + $0x1750] sm:$0xff]
  %v755 = vld [vmem:[%s0 + $0x1758] sm:$0xff]
  %v756 = vld [vmem:[%s0 + $0x1760] sm:$0xff]
  %v757 = vld [vmem:[%s0 + $0x1768] sm:$0xff]
  %v758 = vld [vmem:[%s0 + $0x1770] sm:$0xff]
  %v759 = vld [vmem:[%s0 + $0x1778] sm:$0xff]
  %v760 = vld [vmem:[%s0 + $0x1780] sm:$0xff]
  %v761 = vld [vmem:[%s0 + $0x1788] sm:$0xff]
  %v762 = vld [vmem:[%s0 + $0x1790] sm:$0xff]
  %v763 = vld [vmem:[%s0 + $0x1798] sm:$0xff]
  %v764 = vld [vmem:[%s0 + $0x17a0] sm:$0xff]
  %v765 = vld [vmem:[%s0 + $0x17a8] sm:$0xff]
  %v766 = vld [vmem:[%s0 + $0x17b0] sm:$0xff]
  %v767 = vld [vmem:[%s0 + $0x17b8] sm:$0xff]
  %v768 = vld [vmem:[%s0 + $0x17c0] sm:$0xff]
  %v769 = vld [vmem:[%s0 + $0x17c8] sm:$0xff]
  %v770 = vld [vmem:[%s0 + $0x17d0] sm:$0xff]
  %v771 = vld [vmem:[%s0 + $0x17d8] sm:$0xff]
  %v772 = vld [vmem:[%s0 + $0x17e0] sm:$0xff]
  %v773 = vld [vmem:[%s0 + $0x17e8] sm:$0xff]
  %v774 = vld [vmem:[%s0 + $0x17f0] sm:$0xff]
  %v775 = vld [vmem:[%s0 + $0x17f8] sm:$0xff]
  %v776 = vld [vmem:[%s0 + $0x1800] sm:$0xff]
  %v777 = vld [vmem:[%s0 + $0x1808] sm:$0xff]
  %v778 = vld [vmem:[%s0 + $0x1810] sm:$0xff]
  %v779 = vld [vmem:[%s0 + $0x1818] sm:$0xff]
  %v780 = vld [vmem:[%s0 + $0x1820] sm:$0xff]
  %v781 = vld [vmem:[%s0 + $0x1828] sm:$0xff]
  %v782 = vld [vmem:[%s0 + $0x1830] sm:$0xff]
  %v783 = vld [vmem:[%s0 + $0x1838] sm:$0xff]
  %v784 = vld [vmem:[%s0 + $0x1840] sm:$0xff]
  %v785 = vld [vmem:[%s0 + $0x1848] sm:$0xff]
  %v786 = vld [vmem:[%s0 + $0x1850] sm:$0xff]
  %v787 = vld [vmem:[%s0 + $0x1858] sm:$0xff]
  %v788 = vld [vmem:[%s0 + $0x1860] sm:$0xff]
  %v789 = vld [vmem:[%s0 + $0x1868] sm:$0xff]
  %v790 = vld [vmem:[%s0 + $0x1870] sm:$0xff]
  %v791 = vld [vmem:[%s0 + $0x1878] sm:$0xff]
  %v792 = vld [vmem:[%s0 + $0x1880] sm:$0xff]
  %v793 = vld [vmem:[%s0 + $0x1888] sm:$0xff]
  %v794 = vld [vmem:[%s0 + $0x1890] sm:$0xff]
  %v795 = vld [vmem:[%s0 + $0x1898] sm:$0xff]
  %v796 = vld [vmem:[%s0 + $0x18a0] sm:$0xff]
  %v797 = vld [vmem:[%s0 + $0x18a8] sm:$0xff]
  %v798 = vld [vmem:[%s0 + $0x18b0] sm:$0xff]
  %v799 = vld [vmem:[%s0 + $0x18b8] sm:$0xff]
  %v800 = vld [vmem:[%s0 + $0x18c0] sm:$0xff]
  %v801 = vld [vmem:[%s0 + $0x18c8] sm:$0xff]
  %v802 = vld [vmem:[%s0 + $0x18d0] sm:$0xff]
  %v803 = vld [vmem:[%s0 + $0x18d8] sm:$0xff]
  %v804 = vld [vmem:[%s0 + $0x18e0] sm:$0xff]
  %v805 = vld [vmem:[%s0 + $0x18e8] sm:$0x3]
  %v806 = vld [vmem:[%s0 + $0x18f0] sm:$0xff]
  %v807 = vld [vmem:[%s0 + $0x18f8] sm:$0xff]
  %v808 = vld [vmem:[%s0 + $0x1900] sm:$0xff]
  %v809 = vld [vmem:[%s0 + $0x1908] sm:$0xff]
  %v810 = vld [vmem:[%s0 + $0x1910] sm:$0xff]
  %v811 = vld [vmem:[%s0 + $0x1918] sm:$0xff]
  %v812 = vld [vmem:[%s0 + $0x1920] sm:$0xff]
  %v813 = vld [vmem:[%s0 + $0x1928] sm:$0xff]
  %v814 = vld [vmem:[%s0 + $0x1930] sm:$0xff]
  %v815 = vld [vmem:[%s0 + $0x1938] sm:$0xff]
  %v816 = vld [vmem:[%s0 + $0x1940] sm:$0xff]
  %v817 = vld [vmem:[%s0 + $0x1948] sm:$0xff]
  %v818 = vld [vmem:[%s0 + $0x1950] sm:$0xff]
  %v819 = vld [vmem:[%s0 + $0x1958] sm:$0xff]
  %v820 = vld [vmem:[%s0 + $0x1960] sm:$0xff]
  %v821 = vld [vmem:[%s0 + $0x1968] sm:$0xff]
  %v822 = vld [vmem:[%s0 + $0x1970] sm:$0xff]
  %v823 = vld [vmem:[%s0 + $0x1978] sm:$0xff]
  %v824 = vld [vmem:[%s0 + $0x1980] sm:$0xff]
  %v825 = vld [vmem:[%s0 + $0x1988] sm:$0xff]
  %v826 = vld [vmem:[%s0 + $0x1990] sm:$0xff]
  %v827 = vld [vmem:[%s0 + $0x1998] sm:$0xff]
  %v828 = vld [vmem:[%s0 + $0x19a0] sm:$0xff]
  %v829 = vld [vmem:[%s0 + $0x19a8] sm:$0xff]
  %v830 = vld [vmem:[%s0 + $0x19b0] sm:$0xff]
  %v831 = vld [vmem:[%s0 + $0x19b8] sm:$0xff]
  %v832 = vld [vmem:[%s0 + $0x19c0] sm:$0xff]
  %v833 = vld [vmem:[%s0 + $0x19c8] sm:$0xff]
  %v834 = vld [vmem:[%s0 + $0x19d0] sm:$0xff]
  %v835 = vld [vmem:[%s0 + $0x19d8] sm:$0xff]
  %v836 = vld [vmem:[%s0 + $0x19e0] sm:$0xff]
  %v837 = vld [vmem:[%s0 + $0x19e8] sm:$0xff]
  %v838 = vld [vmem:[%s0 + $0x19f0] sm:$0xff]
  %v839 = vld [vmem:[%s0 + $0x19f8] sm:$0xff]
  %v840 = vld [vmem:[%s0 + $0x1a00] sm:$0xff]
  %v841 = vld [vmem:[%s0 + $0x1a08] sm:$0xff]
  %v842 = vld [vmem:[%s0 + $0x1a10] sm:$0xff]
  %v843 = vld [vmem:[%s0 + $0x1a18] sm:$0xff]
  %v844 = vld [vmem:[%s0 + $0x1a20] sm:$0xff]
  %v845 = vld [vmem:[%s0 + $0x1a28] sm:$0xff]
  %v846 = vld [vmem:[%s0 + $0x1a30] sm:$0xff]
  %v847 = vld [vmem:[%s0 + $0x1a38] sm:$0xff]
  %v848 = vld [vmem:[%s0 + $0x1a40] sm:$0xff]
  %v849 = vld [vmem:[%s0 + $0x1a48] sm:$0xff]
  %v850 = vld [vmem:[%s0 + $0x1a50] sm:$0xff]
  %v851 = vld [vmem:[%s0 + $0x1a58] sm:$0xff]
  %v852 = vld [vmem:[%s0 + $0x1a60] sm:$0xff]
  %v853 = vld [vmem:[%s0 + $0x1a68] sm:$0xff]
  %v854 = vld [vmem:[%s0 + $0x1a70] sm:$0xff]
  %v855 = vld [vmem:[%s0 + $0x1a78] sm:$0xff]
  %v856 = vld [vmem:[%s0 + $0x1a80] sm:$0xff]
  %v857 = vld [vmem:[%s0 + $0x1a88] sm:$0xff]
  %v858 = vld [vmem:[%s0 + $0x1a90] sm:$0xff]
  %v859 = vld [vmem:[%s0 + $0x1a98] sm:$0xff]
  %v860 = vld [vmem:[%s0 + $0x1aa0] sm:$0xff]
  %v861 = vld [vmem:[%s0 + $0x1aa8] sm:$0xff]
  %v862 = vld [vmem:[%s0 + $0x1ab0] sm:$0xff]
  %v863 = vld [vmem:[%s0 + $0x1ab8] sm:$0xff]
  %v864 = vld [vmem:[%s0 + $0x1ac0] sm:$0xff]
  %v865 = vld [vmem:[%s0 + $0x1ac8] sm:$0xff]
  %v866 = vld [vmem:[%s0 + $0x1ad0] sm:$0xff]
  %v867 = vld [vmem:[%s0 + $0x1ad8] sm:$0xff]
  %v868 = vld [vmem:[%s0 + $0x1ae0] sm:$0xff]
  %v869 = vld [vmem:[%s0 + $0x1ae8] sm:$0xff]
  %v870 = vld [vmem:[%s0 + $0x1af0] sm:$0xff]
  %v871 = vld [vmem:[%s0 + $0x1af8] sm:$0xff]
  %v872 = vld [vmem:[%s0 + $0x1b00] sm:$0xff]
  %v873 = vld [vmem:[%s0 + $0x1b08] sm:$0xff]
  %v874 = vld [vmem:[%s0 + $0x1b10] sm:$0xff]
  %v875 = vld [vmem:[%s0 + $0x1b18] sm:$0xff]
  %v876 = vld [vmem:[%s0 + $0x1b20] sm:$0xff]
  %v877 = vld [vmem:[%s0 + $0x1b28] sm:$0xff]
  %v878 = vld [vmem:[%s0 + $0x1b30] sm:$0xff]
  %v879 = vld [vmem:[%s0 + $0x1b38] sm:$0xff]
  %v880 = vld [vmem:[%s0 + $0x1b40] sm:$0xff]
  %v881 = vld [vmem:[%s0 + $0x1b48] sm:$0xff]
  %v882 = vld [vmem:[%s0 + $0x1b50] sm:$0xff]
  %v883 = vld [vmem:[%s0 + $0x1b58] sm:$0xff]
  %v884 = vld [vmem:[%s0 + $0x1b60] sm:$0xff]
  %v885 = vld [vmem:[%s0 + $0x1b68] sm:$0xff]
  %v886 = vld [vmem:[%s0 + $0x1b70] sm:$0xff]
  %v887 = vld [vmem:[%s0 + $0x1b78] sm:$0xff]
  %v888 = vld [vmem:[%s0 + $0x1b80] sm:$0xff]
  %v889 = vld [vmem:[%s0 + $0x1b88] sm:$0xff]
  %v890 = vld [vmem:[%s0 + $0x1b90] sm:$0xff]
  %v891 = vld [vmem:[%s0 + $0x1b98] sm:$0xff]
  %v892 = vld [vmem:[%s0 + $0x1ba0] sm:$0xff]
  %v893 = vld [vmem:[%s0 + $0x1ba8] sm:$0xff]
  %v894 = vld [vmem:[%s0 + $0x1bb0] sm:$0xff]
  %v895 = vld [vmem:[%s0 + $0x1bb8] sm:$0xff]
  %v896 = vld [vmem:[%s0 + $0x1bc0] sm:$0xff]
  %v897 = vld [vmem:[%s0 + $0x1bc8] sm:$0xff]
  %v898 = vld [vmem:[%s0 + $0x1bd0] sm:$0xff]
  %v899 = vld [vmem:[%s0 + $0x1bd8] sm:$0xff]
  %v900 = vld [vmem:[%s0 + $0x1be0] sm:$0xff]
  %v901 = vld [vmem:[%s0 + $0x1be8] sm:$0xff]
  %v902 = vld [vmem:[%s0 + $0x1bf0] sm:$0xff]
  %v903 = vld [vmem:[%s0 + $0x1bf8] sm:$0xff]
  %v904 = vld [vmem:[%s0 + $0x1c00] sm:$0xff]
  %v905 = vld [vmem:[%s0 + $0x1c08] sm:$0xff]
  %v906 = vld [vmem:[%s0 + $0x1c10] sm:$0xff]
  %v907 = vld [vmem:[%s0 + $0x1c18] sm:$0xff]
  %v908 = vld [vmem:[%s0 + $0x1c20] sm:$0xff]
  %v909 = vld [vmem:[%s0 + $0x1c28] sm:$0xff]
  %v910 = vld [vmem:[%s0 + $0x1c30] sm:$0xff]
  %v911 = vld [vmem:[%s0 + $0x1c38] sm:$0xff]
  %v912 = vld [vmem:[%s0 + $0x1c40] sm:$0xff]
  %v913 = vld [vmem:[%s0 + $0x1c48] sm:$0xff]
  %v914 = vld [vmem:[%s0 + $0x1c50] sm:$0xff]
  %v915 = vld [vmem:[%s0 + $0x1c58] sm:$0xff]
  %v916 = vld [vmem:[%s0 + $0x1c60] sm:$0xff]
  %v917 = vld [vmem:[%s0 + $0x1c68] sm:$0xff]
  %v918 = vld [vmem:[%s0 + $0x1c70] sm:$0xff]
  %v919 = vld [vmem:[%s0 + $0x1c78] sm:$0xff]
  %v920 = vld [vmem:[%s0 + $0x1c80] sm:$0xff]
  %v921 = vld [vmem:[%s0 + $0x1c88] sm:$0xff]
  %v922 = vld [vmem:[%s0 + $0x1c90] sm:$0xff]
  %v923 = vld [vmem:[%s0 + $0x1c98] sm:$0xff]
  %v924 = vld [vmem:[%s0 + $0x1ca0] sm:$0xff]
  %v925 = vld [vmem:[%s0 + $0x1ca8] sm:$0xff]
  %v926 = vld [vmem:[%s0 + $0x1cb0] sm:$0xff]
  %v927 = vld [vmem:[%s0 + $0x1cb8] sm:$0xff]
  %v928 = vld [vmem:[%s0 + $0x1cc0] sm:$0xff]
  %v929 = vld [vmem:[%s0 + $0x1cc8] sm:$0xff]
  %v930 = vld [vmem:[%s0 + $0x1cd0] sm:$0xff]
  %v931 = vld [vmem:[%s0 + $0x1cd8] sm:$0xff]
  %v932 = vld [vmem:[%s0 + $0x1ce0] sm:$0xff]
  %v933 = vld [vmem:[%s0 + $0x1ce8] sm:$0xff]
  %v934 = vld [vmem:[%s0 + $0x1cf0] sm:$0xff]
  %v935 = vld [vmem:[%s0 + $0x1cf8] sm:$0xff]
  %v936 = vld [vmem:[%s0 + $0x1d00] sm:$0xff]
  %v937 = vld [vmem:[%s0 + $0x1d08] sm:$0xff]
  %v938 = vld [vmem:[%s0 + $0x1d10] sm:$0x3]
  %v939 = vld [vmem:[%s0 + $0x1d18] sm:$0xff]
  %v940 = vld [vmem:[%s0 + $0x1d20] sm:$0xff]
  %v941 = vld [vmem:[%s0 + $0x1d28] sm:$0xff]
  %v942 = vld [vmem:[%s0 + $0x1d30] sm:$0xff]
  %v943 = vld [vmem:[%s0 + $0x1d38] sm:$0xff]
  %v944 = vld [vmem:[%s0 + $0x1d40] sm:$0xff]
  %v945 = vld [vmem:[%s0 + $0x1d48] sm:$0xff]
  %v946 = vld [vmem:[%s0 + $0x1d50] sm:$0xff]
  %v947 = vld [vmem:[%s0 + $0x1d58] sm:$0xff]
  %v948 = vld [vmem:[%s0 + $0x1d60] sm:$0xff]
  %v949 = vld [vmem:[%s0 + $0x1d68] sm:$0xff]
  %v950 = vld [vmem:[%s0 + $0x1d70] sm:$0xff]
  %v951 = vld [vmem:[%s0 + $0x1d78] sm:$0xff]
  %v952 = vld [vmem:[%s0 + $0x1d80] sm:$0xff]
  %v953 = vld [vmem:[%s0 + $0x1d88] sm:$0xff]
  %v954 = vld [vmem:[%s0 + $0x1d90] sm:$0xff]
  %v955 = vld [vmem:[%s0 + $0x1d98] sm:$0xff]
  %v956 = vld [vmem:[%s0 + $0x1da0] sm:$0xff]
  %v957 = vld [vmem:[%s0 + $0x1da8] sm:$0xff]
  %v958 = vld [vmem:[%s0 + $0x1db0] sm:$0xff]
  %v959 = vld [vmem:[%s0 + $0x1db8] sm:$0xff]
  %v960 = vld [vmem:[%s0 + $0x1dc0] sm:$0xff]
  %v961 = vld [vmem:[%s0 + $0x1dc8] sm:$0xff]
  %v962 = vld [vmem:[%s0 + $0x1dd0] sm:$0xff]
  %v963 = vld [vmem:[%s0 + $0x1dd8] sm:$0xff]
  %v964 = vld [vmem:[%s0 + $0x1de0] sm:$0xff]
  %v965 = vld [vmem:[%s0 + $0x1de8] sm:$0xff]
  %v966 = vld [vmem:[%s0 + $0x1df0] sm:$0xff]
  %v967 = vld [vmem:[%s0 + $0x1df8] sm:$0xff]
  %v968 = vld [vmem:[%s0 + $0x1e00] sm:$0xff]
  %v969 = vld [vmem:[%s0 + $0x1e08] sm:$0xff]
  %v970 = vld [vmem:[%s0 + $0x1e10] sm:$0xff]
  %v971 = vld [vmem:[%s0 + $0x1e18] sm:$0xff]
  %v972 = vld [vmem:[%s0 + $0x1e20] sm:$0xff]
  %v973 = vld [vmem:[%s0 + $0x1e28] sm:$0xff]
  %v974 = vld [vmem:[%s0 + $0x1e30] sm:$0xff]
  %v975 = vld [vmem:[%s0 + $0x1e38] sm:$0xff]
  %v976 = vld [vmem:[%s0 + $0x1e40] sm:$0xff]
  %v977 = vld [vmem:[%s0 + $0x1e48] sm:$0xff]
  %v978 = vld [vmem:[%s0 + $0x1e50] sm:$0xff]
  %v979 = vld [vmem:[%s0 + $0x1e58] sm:$0xff]
  %v980 = vld [vmem:[%s0 + $0x1e60] sm:$0xff]
  %v981 = vld [vmem:[%s0 + $0x1e68] sm:$0xff]
  %v982 = vld [vmem:[%s0 + $0x1e70] sm:$0xff]
  %v983 = vld [vmem:[%s0 + $0x1e78] sm:$0xff]
  %v984 = vld [vmem:[%s0 + $0x1e80] sm:$0xff]
  %v985 = vld [vmem:[%s0 + $0x1e88] sm:$0xff]
  %v986 = vld [vmem:[%s0 + $0x1e90] sm:$0xff]
  %v987 = vld [vmem:[%s0 + $0x1e98] sm:$0xff]
  %v988 = vld [vmem:[%s0 + $0x1ea0] sm:$0xff]
  %v989 = vld [vmem:[%s0 + $0x1ea8] sm:$0xff]
  %v990 = vld [vmem:[%s0 + $0x1eb0] sm:$0xff]
  %v991 = vld [vmem:[%s0 + $0x1eb8] sm:$0xff]
  %v992 = vld [vmem:[%s0 + $0x1ec0] sm:$0xff]
  %v993 = vld [vmem:[%s0 + $0x1ec8] sm:$0xff]
  %v994 = vld [vmem:[%s0 + $0x1ed0] sm:$0xff]
  %v995 = vld [vmem:[%s0 + $0x1ed8] sm:$0xff]
  %v996 = vld [vmem:[%s0 + $0x1ee0] sm:$0xff]
  %v997 = vld [vmem:[%s0 + $0x1ee8] sm:$0xff]
  %v998 = vld [vmem:[%s0 + $0x1ef0] sm:$0xff]
  %v999 = vld [vmem:[%s0 + $0x1ef8] sm:$0xff]
  %v1000 = vld [vmem:[%s0 + $0x1f00] sm:$0xff]
  %v1001 = vld [vmem:[%s0 + $0x1f08] sm:$0xff]
  %v1002 = vld [vmem:[%s0 + $0x1f10] sm:$0xff]
  %v1003 = vld [vmem:[%s0 + $0x1f18] sm:$0xff]
  %v1004 = vld [vmem:[%s0 + $0x1f20] sm:$0xff]
  %v1005 = vld [vmem:[%s0 + $0x1f28] sm:$0xff]
  %v1006 = vld [vmem:[%s0 + $0x1f30] sm:$0xff]
  %v1007 = vld [vmem:[%s0 + $0x1f38] sm:$0xff]
  %v1008 = vld [vmem:[%s0 + $0x1f40] sm:$0xff]
  %v1009 = vld [vmem:[%s0 + $0x1f48] sm:$0xff]
  %v1010 = vld [vmem:[%s0 + $0x1f50] sm:$0xff]
  %v1011 = vld [vmem:[%s0 + $0x1f58] sm:$0xff]
  %v1012 = vld [vmem:[%s0 + $0x1f60] sm:$0xff]
  %v1013 = vld [vmem:[%s0 + $0x1f68] sm:$0xff]
  %v1014 = vld [vmem:[%s0 + $0x1f70] sm:$0xff]
  %v1015 = vld [vmem:[%s0 + $0x1f78] sm:$0xff]
  %v1016 = vld [vmem:[%s0 + $0x1f80] sm:$0xff]
  %v1017 = vld [vmem:[%s0 + $0x1f88] sm:$0xff]
  %v1018 = vld [vmem:[%s0 + $0x1f90] sm:$0xff]
  %v1019 = vld [vmem:[%s0 + $0x1f98] sm:$0xff]
  %v1020 = vld [vmem:[%s0 + $0x1fa0] sm:$0xff]
  %v1021 = vld [vmem:[%s0 + $0x1fa8] sm:$0xff]
  %v1022 = vld [vmem:[%s0 + $0x1fb0] sm:$0xff]
  %v1023 = vld [vmem:[%s0 + $0x1fb8] sm:$0xff]
  %v1024 = vld [vmem:[%s0 + $0x1fc0] sm:$0xff]
  %v1025 = vld [vmem:[%s0 + $0x1fc8] sm:$0xff]
  %v1026 = vld [vmem:[%s0 + $0x1fd0] sm:$0xff]
  %v1027 = vld [vmem:[%s0 + $0x1fd8] sm:$0xff]
  %v1028 = vld [vmem:[%s0 + $0x1fe0] sm:$0xff]
  %v1029 = vld [vmem:[%s0 + $0x1fe8] sm:$0xff]
  %v1030 = vld [vmem:[%s0 + $0x1ff0] sm:$0xff]
  %v1031 = vld [vmem:[%s0 + $0x1ff8] sm:$0xff]
  %v1032 = vld [vmem:[%s0 + $0x2000] sm:$0xff]
  %v1033 = vld [vmem:[%s0 + $0x2008] sm:$0xff]
  %v1034 = vld [vmem:[%s0 + $0x2010] sm:$0xff]
  %v1035 = vld [vmem:[%s0 + $0x2018] sm:$0xff]
  %v1036 = vld [vmem:[%s0 + $0x2020] sm:$0xff]
  %v1037 = vld [vmem:[%s0 + $0x2028] sm:$0xff]
  %v1038 = vld [vmem:[%s0 + $0x2030] sm:$0xff]
  %v1039 = vld [vmem:[%s0 + $0x2038] sm:$0xff]
  %v1040 = vld [vmem:[%s0 + $0x2040] sm:$0xff]
  %v1041 = vld [vmem:[%s0 + $0x2048] sm:$0xff]
  %v1042 = vld [vmem:[%s0 + $0x2050] sm:$0xff]
  %v1043 = vld [vmem:[%s0 + $0x2058] sm:$0xff]
  %v1044 = vld [vmem:[%s0 + $0x2060] sm:$0xff]
  %v1045 = vld [vmem:[%s0 + $0x2068] sm:$0xff]
  %v1046 = vld [vmem:[%s0 + $0x2070] sm:$0xff]
  %v1047 = vld [vmem:[%s0 + $0x2078] sm:$0xff]
  %v1048 = vld [vmem:[%s0 + $0x2080] sm:$0xff]
  %v1049 = vld [vmem:[%s0 + $0x2088] sm:$0xff]
  %v1050 = vld [vmem:[%s0 + $0x2090] sm:$0xff]
  %v1051 = vld [vmem:[%s0 + $0x2098] sm:$0xff]
  %v1052 = vld [vmem:[%s0 + $0x20a0] sm:$0xff]
  %v1053 = vld [vmem:[%s0 + $0x20a8] sm:$0xff]
  %v1054 = vld [vmem:[%s0 + $0x20b0] sm:$0xff]
  %v1055 = vld [vmem:[%s0 + $0x20b8] sm:$0xff]
  %v1056 = vld [vmem:[%s0 + $0x20c0] sm:$0xff]
  %v1057 = vld [vmem:[%s0 + $0x20c8] sm:$0xff]
  %v1058 = vld [vmem:[%s0 + $0x20d0] sm:$0xff]
  %v1059 = vld [vmem:[%s0 + $0x20d8] sm:$0xff]
  %v1060 = vld [vmem:[%s0 + $0x20e0] sm:$0xff]
  %v1061 = vld [vmem:[%s0 + $0x20e8] sm:$0xff]
  %v1062 = vld [vmem:[%s0 + $0x20f0] sm:$0xff]
  %v1063 = vld [vmem:[%s0 + $0x20f8] sm:$0xff]
  %v1064 = vld [vmem:[%s0 + $0x2100] sm:$0xff]
  %v1065 = vld [vmem:[%s0 + $0x2108] sm:$0xff]
  %v1066 = vld [vmem:[%s0 + $0x2110] sm:$0xff]
  %v1067 = vld [vmem:[%s0 + $0x2118] sm:$0xff]
  %v1068 = vld [vmem:[%s0 + $0x2120] sm:$0xff]
  %v1069 = vld [vmem:[%s0 + $0x2128] sm:$0xff]
  %v1070 = vld [vmem:[%s0 + $0x2130] sm:$0xff]
  %v1071 = vld [vmem:[%s0 + $0x2138] sm:$0x3]
  %v1072 = vld [vmem:[%s0 + $0x2140] sm:$0xff]
  %v1073 = vld [vmem:[%s0 + $0x2148] sm:$0xff]
  %v1074 = vld [vmem:[%s0 + $0x2150] sm:$0xff]
  %v1075 = vld [vmem:[%s0 + $0x2158] sm:$0xff]
  %v1076 = vld [vmem:[%s0 + $0x2160] sm:$0xff]
  %v1077 = vld [vmem:[%s0 + $0x2168] sm:$0xff]
  %v1078 = vld [vmem:[%s0 + $0x2170] sm:$0xff]
  %v1079 = vld [vmem:[%s0 + $0x2178] sm:$0xff]
  %v1080 = vld [vmem:[%s0 + $0x2180] sm:$0xff]
  %v1081 = vld [vmem:[%s0 + $0x2188] sm:$0xff]
  %v1082 = vld [vmem:[%s0 + $0x2190] sm:$0xff]
  %v1083 = vld [vmem:[%s0 + $0x2198] sm:$0xff]
  %v1084 = vld [vmem:[%s0 + $0x21a0] sm:$0xff]
  %v1085 = vld [vmem:[%s0 + $0x21a8] sm:$0xff]
  %v1086 = vld [vmem:[%s0 + $0x21b0] sm:$0xff]
  %v1087 = vld [vmem:[%s0 + $0x21b8] sm:$0xff]
  %v1088 = vld [vmem:[%s0 + $0x21c0] sm:$0xff]
  %v1089 = vld [vmem:[%s0 + $0x21c8] sm:$0xff]
  %v1090 = vld [vmem:[%s0 + $0x21d0] sm:$0xff]
  %v1091 = vld [vmem:[%s0 + $0x21d8] sm:$0xff]
  %v1092 = vld [vmem:[%s0 + $0x21e0] sm:$0xff]
  %v1093 = vld [vmem:[%s0 + $0x21e8] sm:$0xff]
  %v1094 = vld [vmem:[%s0 + $0x21f0] sm:$0xff]
  %v1095 = vld [vmem:[%s0 + $0x21f8] sm:$0xff]
  %v1096 = vld [vmem:[%s0 + $0x2200] sm:$0xff]
  %v1097 = vld [vmem:[%s0 + $0x2208] sm:$0xff]
  %v1098 = vld [vmem:[%s0 + $0x2210] sm:$0xff]
  %v1099 = vld [vmem:[%s0 + $0x2218] sm:$0xff]
  %v1100 = vld [vmem:[%s0 + $0x2220] sm:$0xff]
  %v1101 = vld [vmem:[%s0 + $0x2228] sm:$0xff]
  %v1102 = vld [vmem:[%s0 + $0x2230] sm:$0xff]
  %v1103 = vld [vmem:[%s0 + $0x2238] sm:$0xff]
  %v1104 = vld [vmem:[%s0 + $0x2240] sm:$0xff]
  %v1105 = vld [vmem:[%s0 + $0x2248] sm:$0xff]
  %v1106 = vld [vmem:[%s0 + $0x2250] sm:$0xff]
  %v1107 = vld [vmem:[%s0 + $0x2258] sm:$0xff]
  %v1108 = vld [vmem:[%s0 + $0x2260] sm:$0xff]
  %v1109 = vld [vmem:[%s0 + $0x2268] sm:$0xff]
  %v1110 = vld [vmem:[%s0 + $0x2270] sm:$0xff]
  %v1111 = vld [vmem:[%s0 + $0x2278] sm:$0xff]
  %v1112 = vld [vmem:[%s0 + $0x2280] sm:$0xff]
  %v1113 = vld [vmem:[%s0 + $0x2288] sm:$0xff]
  %v1114 = vld [vmem:[%s0 + $0x2290] sm:$0xff]
  %v1115 = vld [vmem:[%s0 + $0x2298] sm:$0xff]
  %v1116 = vld [vmem:[%s0 + $0x22a0] sm:$0xff]
  %v1117 = vld [vmem:[%s0 + $0x22a8] sm:$0xff]
  %v1118 = vld [vmem:[%s0 + $0x22b0] sm:$0xff]
  %v1119 = vld [vmem:[%s0 + $0x22b8] sm:$0xff]
  %v1120 = vld [vmem:[%s0 + $0x22c0] sm:$0xff]
  %v1121 = vld [vmem:[%s0 + $0x22c8] sm:$0xff]
  %v1122 = vld [vmem:[%s0 + $0x22d0] sm:$0xff]
  %v1123 = vld [vmem:[%s0 + $0x22d8] sm:$0xff]
  %v1124 = vld [vmem:[%s0 + $0x22e0] sm:$0xff]
  %v1125 = vld [vmem:[%s0 + $0x22e8] sm:$0xff]
  %v1126 = vld [vmem:[%s0 + $0x22f0] sm:$0xff]
  %v1127 = vld [vmem:[%s0 + $0x22f8] sm:$0xff]
  %v1128 = vld [vmem:[%s0 + $0x2300] sm:$0xff]
  %v1129 = vld [vmem:[%s0 + $0x2308] sm:$0xff]
  %v1130 = vld [vmem:[%s0 + $0x2310] sm:$0xff]
  %v1131 = vld [vmem:[%s0 + $0x2318] sm:$0xff]
  %v1132 = vld [vmem:[%s0 + $0x2320] sm:$0xff]
  %v1133 = vld [vmem:[%s0 + $0x2328] sm:$0xff]
  %v1134 = vld [vmem:[%s0 + $0x2330] sm:$0xff]
  %v1135 = vld [vmem:[%s0 + $0x2338] sm:$0xff]
  %v1136 = vld [vmem:[%s0 + $0x2340] sm:$0xff]
  %v1137 = vld [vmem:[%s0 + $0x2348] sm:$0xff]
  %v1138 = vld [vmem:[%s0 + $0x2350] sm:$0xff]
  %v1139 = vld [vmem:[%s0 + $0x2358] sm:$0xff]
  %v1140 = vld [vmem:[%s0 + $0x2360] sm:$0xff]
  %v1141 = vld [vmem:[%s0 + $0x2368] sm:$0xff]
  %v1142 = vld [vmem:[%s0 + $0x2370] sm:$0xff]
  %v1143 = vld [vmem:[%s0 + $0x2378] sm:$0xff]
  %v1144 = vld [vmem:[%s0 + $0x2380] sm:$0xff]
  %v1145 = vld [vmem:[%s0 + $0x2388] sm:$0xff]
  %v1146 = vld [vmem:[%s0 + $0x2390] sm:$0xff]
  %v1147 = vld [vmem:[%s0 + $0x2398] sm:$0xff]
  %v1148 = vld [vmem:[%s0 + $0x23a0] sm:$0xff]
  %v1149 = vld [vmem:[%s0 + $0x23a8] sm:$0xff]
  %v1150 = vld [vmem:[%s0 + $0x23b0] sm:$0xff]
  %v1151 = vld [vmem:[%s0 + $0x23b8] sm:$0xff]
  %v1152 = vld [vmem:[%s0 + $0x23c0] sm:$0xff]
  %v1153 = vld [vmem:[%s0 + $0x23c8] sm:$0xff]
  %v1154 = vld [vmem:[%s0 + $0x23d0] sm:$0xff]
  %v1155 = vld [vmem:[%s0 + $0x23d8] sm:$0xff]
  %v1156 = vld [vmem:[%s0 + $0x23e0] sm:$0xff]
  %v1157 = vld [vmem:[%s0 + $0x23e8] sm:$0xff]
  %v1158 = vld [vmem:[%s0 + $0x23f0] sm:$0xff]
  %v1159 = vld [vmem:[%s0 + $0x23f8] sm:$0xff]
  %v1160 = vld [vmem:[%s0 + $0x2400] sm:$0xff]
  %v1161 = vld [vmem:[%s0 + $0x2408] sm:$0xff]
  %v1162 = vld [vmem:[%s0 + $0x2410] sm:$0xff]
  %v1163 = vld [vmem:[%s0 + $0x2418] sm:$0xff]
  %v1164 = vld [vmem:[%s0 + $0x2420] sm:$0xff]
  %v1165 = vld [vmem:[%s0 + $0x2428] sm:$0xff]
  %v1166 = vld [vmem:[%s0 + $0x2430] sm:$0xff]
  %v1167 = vld [vmem:[%s0 + $0x2438] sm:$0xff]
  %v1168 = vld [vmem:[%s0 + $0x2440] sm:$0xff]
  %v1169 = vld [vmem:[%s0 + $0x2448] sm:$0xff]
  %v1170 = vld [vmem:[%s0 + $0x2450] sm:$0xff]
  %v1171 = vld [vmem:[%s0 + $0x2458] sm:$0xff]
  %v1172 = vld [vmem:[%s0 + $0x2460] sm:$0xff]
  %v1173 = vld [vmem:[%s0 + $0x2468] sm:$0xff]
  %v1174 = vld [vmem:[%s0 + $0x2470] sm:$0xff]
  %v1175 = vld [vmem:[%s0 + $0x2478] sm:$0xff]
  %v1176 = vld [vmem:[%s0 + $0x2480] sm:$0xff]
  %v1177 = vld [vmem:[%s0 + $0x2488] sm:$0xff]
  %v1178 = vld [vmem:[%s0 + $0x2490] sm:$0xff]
  %v1179 = vld [vmem:[%s0 + $0x2498] sm:$0xff]
  %v1180 = vld [vmem:[%s0 + $0x24a0] sm:$0xff]
  %v1181 = vld [vmem:[%s0 + $0x24a8] sm:$0xff]
  %v1182 = vld [vmem:[%s0 + $0x24b0] sm:$0xff]
  %v1183 = vld [vmem:[%s0 + $0x24b8] sm:$0xff]
  %v1184 = vld [vmem:[%s0 + $0x24c0] sm:$0xff]
  %v1185 = vld [vmem:[%s0 + $0x24c8] sm:$0xff]
  %v1186 = vld [vmem:[%s0 + $0x24d0] sm:$0xff]
  %v1187 = vld [vmem:[%s0 + $0x24d8] sm:$0xff]
  %v1188 = vld [vmem:[%s0 + $0x24e0] sm:$0xff]
  %v1189 = vld [vmem:[%s0 + $0x24e8] sm:$0xff]
  %v1190 = vld [vmem:[%s0 + $0x24f0] sm:$0xff]
  %v1191 = vld [vmem:[%s0 + $0x24f8] sm:$0xff]
  %v1192 = vld [vmem:[%s0 + $0x2500] sm:$0xff]
  %v1193 = vld [vmem:[%s0 + $0x2508] sm:$0xff]
  %v1194 = vld [vmem:[%s0 + $0x2510] sm:$0xff]
  %v1195 = vld [vmem:[%s0 + $0x2518] sm:$0xff]
  %v1196 = vld [vmem:[%s0 + $0x2520] sm:$0xff]
  %v1197 = vld [vmem:[%s0 + $0x2528] sm:$0xff]
  %v1198 = vld [vmem:[%s0 + $0x2530] sm:$0xff]
  %v1199 = vld [vmem:[%s0 + $0x2538] sm:$0xff]
  %v1200 = vld [vmem:[%s0 + $0x2540] sm:$0xff]
  %v1201 = vld [vmem:[%s0 + $0x2548] sm:$0xff]
  %v1202 = vld [vmem:[%s0 + $0x2550] sm:$0xff]
  %v1203 = vld [vmem:[%s0 + $0x2558] sm:$0xff]
  %v1204 = vld [vmem:[%s0 + $0x2560] sm:$0x3]
  %vm1205 = vcmask 523264
  %v1206 = vsel %vm1205, %v8, -inf
  %v1207 = vsel %vm1205, %v141, -inf
  %v1208 = vmax.f32 %v1206, %v1207
  %v1209 = vsel %vm1205, %v274, -inf
  %v1210 = vmax.f32 %v1208, %v1209
  %v1211 = vsel %vm1205, %v407, -inf
  %v1212 = vmax.f32 %v1210, %v1211
  %v1213 = vsel %vm1205, %v540, -inf
  %v1214 = vmax.f32 %v1212, %v1213
  %v1215 = vsel %vm1205, %v673, -inf
  %v1216 = vmax.f32 %v1214, %v1215
  %v1217 = vsel %vm1205, %v806, -inf
  %v1218 = vmax.f32 %v1216, %v1217
  %v1219 = vsel %vm1205, %v939, -inf
  %v1220 = vmax.f32 %v1218, %v1219
  %v1221 = vsel %vm1205, %v1072, -inf
  %v1222 = vmax.f32 %v1220, %v1221
  %v1223 = vsel %vm1205, %v9, -inf
  %v1224 = vsel %vm1205, %v142, -inf
  %v1225 = vmax.f32 %v1223, %v1224
  %v1226 = vsel %vm1205, %v275, -inf
  %v1227 = vmax.f32 %v1225, %v1226
  %v1228 = vsel %vm1205, %v408, -inf
  %v1229 = vmax.f32 %v1227, %v1228
  %v1230 = vsel %vm1205, %v541, -inf
  %v1231 = vmax.f32 %v1229, %v1230
  %v1232 = vsel %vm1205, %v674, -inf
  %v1233 = vmax.f32 %v1231, %v1232
  %v1234 = vsel %vm1205, %v807, -inf
  %v1235 = vmax.f32 %v1233, %v1234
  %v1236 = vsel %vm1205, %v940, -inf
  %v1237 = vmax.f32 %v1235, %v1236
  %v1238 = vsel %vm1205, %v1073, -inf
  %v1239 = vmax.f32 %v1237, %v1238
  %v1240 = vsel %vm1205, %v10, -inf
  %v1241 = vsel %vm1205, %v143, -inf
  %v1242 = vmax.f32 %v1240, %v1241
  %v1243 = vsel %vm1205, %v276, -inf
  %v1244 = vmax.f32 %v1242, %v1243
  %v1245 = vsel %vm1205, %v409, -inf
  %v1246 = vmax.f32 %v1244, %v1245
  %v1247 = vsel %vm1205, %v542, -inf
  %v1248 = vmax.f32 %v1246, %v1247
  %v1249 = vsel %vm1205, %v675, -inf
  %v1250 = vmax.f32 %v1248, %v1249
  %v1251 = vsel %vm1205, %v808, -inf
  %v1252 = vmax.f32 %v1250, %v1251
  %v1253 = vsel %vm1205, %v941, -inf
  %v1254 = vmax.f32 %v1252, %v1253
  %v1255 = vsel %vm1205, %v1074, -inf
  %v1256 = vmax.f32 %v1254, %v1255
  %v1257 = vsel %vm1205, %v11, -inf
  %v1258 = vsel %vm1205, %v144, -inf
  %v1259 = vmax.f32 %v1257, %v1258
  %v1260 = vsel %vm1205, %v277, -inf
  %v1261 = vmax.f32 %v1259, %v1260
  %v1262 = vsel %vm1205, %v410, -inf
  %v1263 = vmax.f32 %v1261, %v1262
  %v1264 = vsel %vm1205, %v543, -inf
  %v1265 = vmax.f32 %v1263, %v1264
  %v1266 = vsel %vm1205, %v676, -inf
  %v1267 = vmax.f32 %v1265, %v1266
  %v1268 = vsel %vm1205, %v809, -inf
  %v1269 = vmax.f32 %v1267, %v1268
  %v1270 = vsel %vm1205, %v942, -inf
  %v1271 = vmax.f32 %v1269, %v1270
  %v1272 = vsel %vm1205, %v1075, -inf
  %v1273 = vmax.f32 %v1271, %v1272
  %v1274 = vsel %vm1205, %v12, -inf
  %v1275 = vsel %vm1205, %v145, -inf
  %v1276 = vmax.f32 %v1274, %v1275
  %v1277 = vsel %vm1205, %v278, -inf
  %v1278 = vmax.f32 %v1276, %v1277
  %v1279 = vsel %vm1205, %v411, -inf
  %v1280 = vmax.f32 %v1278, %v1279
  %v1281 = vsel %vm1205, %v544, -inf
  %v1282 = vmax.f32 %v1280, %v1281
  %v1283 = vsel %vm1205, %v677, -inf
  %v1284 = vmax.f32 %v1282, %v1283
  %v1285 = vsel %vm1205, %v810, -inf
  %v1286 = vmax.f32 %v1284, %v1285
  %v1287 = vsel %vm1205, %v943, -inf
  %v1288 = vmax.f32 %v1286, %v1287
  %v1289 = vsel %vm1205, %v1076, -inf
  %v1290 = vmax.f32 %v1288, %v1289
  %v1291 = vsel %vm1205, %v13, -inf
  %v1292 = vsel %vm1205, %v146, -inf
  %v1293 = vmax.f32 %v1291, %v1292
  %v1294 = vsel %vm1205, %v279, -inf
  %v1295 = vmax.f32 %v1293, %v1294
  %v1296 = vsel %vm1205, %v412, -inf
  %v1297 = vmax.f32 %v1295, %v1296
  %v1298 = vsel %vm1205, %v545, -inf
  %v1299 = vmax.f32 %v1297, %v1298
  %v1300 = vsel %vm1205, %v678, -inf
  %v1301 = vmax.f32 %v1299, %v1300
  %v1302 = vsel %vm1205, %v811, -inf
  %v1303 = vmax.f32 %v1301, %v1302
  %v1304 = vsel %vm1205, %v944, -inf
  %v1305 = vmax.f32 %v1303, %v1304
  %v1306 = vsel %vm1205, %v1077, -inf
  %v1307 = vmax.f32 %v1305, %v1306
  %v1308 = vsel %vm1205, %v14, -inf
  %v1309 = vsel %vm1205, %v147, -inf
  %v1310 = vmax.f32 %v1308, %v1309
  %v1311 = vsel %vm1205, %v280, -inf
  %v1312 = vmax.f32 %v1310, %v1311
  %v1313 = vsel %vm1205, %v413, -inf
  %v1314 = vmax.f32 %v1312, %v1313
  %v1315 = vsel %vm1205, %v546, -inf
  %v1316 = vmax.f32 %v1314, %v1315
  %v1317 = vsel %vm1205, %v679, -inf
  %v1318 = vmax.f32 %v1316, %v1317
  %v1319 = vsel %vm1205, %v812, -inf
  %v1320 = vmax.f32 %v1318, %v1319
  %v1321 = vsel %vm1205, %v945, -inf
  %v1322 = vmax.f32 %v1320, %v1321
  %v1323 = vsel %vm1205, %v1078, -inf
  %v1324 = vmax.f32 %v1322, %v1323
  %v1325 = vsel %vm1205, %v15, -inf
  %v1326 = vsel %vm1205, %v148, -inf
  %v1327 = vmax.f32 %v1325, %v1326
  %v1328 = vsel %vm1205, %v281, -inf
  %v1329 = vmax.f32 %v1327, %v1328
  %v1330 = vsel %vm1205, %v414, -inf
  %v1331 = vmax.f32 %v1329, %v1330
  %v1332 = vsel %vm1205, %v547, -inf
  %v1333 = vmax.f32 %v1331, %v1332
  %v1334 = vsel %vm1205, %v680, -inf
  %v1335 = vmax.f32 %v1333, %v1334
  %v1336 = vsel %vm1205, %v813, -inf
  %v1337 = vmax.f32 %v1335, %v1336
  %v1338 = vsel %vm1205, %v946, -inf
  %v1339 = vmax.f32 %v1337, %v1338
  %v1340 = vsel %vm1205, %v1079, -inf
  %v1341 = vmax.f32 %v1339, %v1340
  %v1342 = vsel %vm1205, %v16, -inf
  %v1343 = vsel %vm1205, %v149, -inf
  %v1344 = vmax.f32 %v1342, %v1343
  %v1345 = vsel %vm1205, %v282, -inf
  %v1346 = vmax.f32 %v1344, %v1345
  %v1347 = vsel %vm1205, %v415, -inf
  %v1348 = vmax.f32 %v1346, %v1347
  %v1349 = vsel %vm1205, %v548, -inf
  %v1350 = vmax.f32 %v1348, %v1349
  %v1351 = vsel %vm1205, %v681, -inf
  %v1352 = vmax.f32 %v1350, %v1351
  %v1353 = vsel %vm1205, %v814, -inf
  %v1354 = vmax.f32 %v1352, %v1353
  %v1355 = vsel %vm1205, %v947, -inf
  %v1356 = vmax.f32 %v1354, %v1355
  %v1357 = vsel %vm1205, %v1080, -inf
  %v1358 = vmax.f32 %v1356, %v1357
  %v1359 = vsel %vm1205, %v17, -inf
  %v1360 = vsel %vm1205, %v150, -inf
  %v1361 = vmax.f32 %v1359, %v1360
  %v1362 = vsel %vm1205, %v283, -inf
  %v1363 = vmax.f32 %v1361, %v1362
  %v1364 = vsel %vm1205, %v416, -inf
  %v1365 = vmax.f32 %v1363, %v1364
  %v1366 = vsel %vm1205, %v549, -inf
  %v1367 = vmax.f32 %v1365, %v1366
  %v1368 = vsel %vm1205, %v682, -inf
  %v1369 = vmax.f32 %v1367, %v1368
  %v1370 = vsel %vm1205, %v815, -inf
  %v1371 = vmax.f32 %v1369, %v1370
  %v1372 = vsel %vm1205, %v948, -inf
  %v1373 = vmax.f32 %v1371, %v1372
  %v1374 = vsel %vm1205, %v1081, -inf
  %v1375 = vmax.f32 %v1373, %v1374
  %v1376 = vsel %vm1205, %v18, -inf
  %v1377 = vsel %vm1205, %v151, -inf
  %v1378 = vmax.f32 %v1376, %v1377
  %v1379 = vsel %vm1205, %v284, -inf
  %v1380 = vmax.f32 %v1378, %v1379
  %v1381 = vsel %vm1205, %v417, -inf
  %v1382 = vmax.f32 %v1380, %v1381
  %v1383 = vsel %vm1205, %v550, -inf
  %v1384 = vmax.f32 %v1382, %v1383
  %v1385 = vsel %vm1205, %v683, -inf
  %v1386 = vmax.f32 %v1384, %v1385
  %v1387 = vsel %vm1205, %v816, -inf
  %v1388 = vmax.f32 %v1386, %v1387
  %v1389 = vsel %vm1205, %v949, -inf
  %v1390 = vmax.f32 %v1388, %v1389
  %v1391 = vsel %vm1205, %v1082, -inf
  %v1392 = vmax.f32 %v1390, %v1391
  %v1393 = vsel %vm1205, %v19, -inf
  %v1394 = vsel %vm1205, %v152, -inf
  %v1395 = vmax.f32 %v1393, %v1394
  %v1396 = vsel %vm1205, %v285, -inf
  %v1397 = vmax.f32 %v1395, %v1396
  %v1398 = vsel %vm1205, %v418, -inf
  %v1399 = vmax.f32 %v1397, %v1398
  %v1400 = vsel %vm1205, %v551, -inf
  %v1401 = vmax.f32 %v1399, %v1400
  %v1402 = vsel %vm1205, %v684, -inf
  %v1403 = vmax.f32 %v1401, %v1402
  %v1404 = vsel %vm1205, %v817, -inf
  %v1405 = vmax.f32 %v1403, %v1404
  %v1406 = vsel %vm1205, %v950, -inf
  %v1407 = vmax.f32 %v1405, %v1406
  %v1408 = vsel %vm1205, %v1083, -inf
  %v1409 = vmax.f32 %v1407, %v1408
  %v1410 = vsel %vm1205, %v20, -inf
  %v1411 = vsel %vm1205, %v153, -inf
  %v1412 = vmax.f32 %v1410, %v1411
  %v1413 = vsel %vm1205, %v286, -inf
  %v1414 = vmax.f32 %v1412, %v1413
  %v1415 = vsel %vm1205, %v419, -inf
  %v1416 = vmax.f32 %v1414, %v1415
  %v1417 = vsel %vm1205, %v552, -inf
  %v1418 = vmax.f32 %v1416, %v1417
  %v1419 = vsel %vm1205, %v685, -inf
  %v1420 = vmax.f32 %v1418, %v1419
  %v1421 = vsel %vm1205, %v818, -inf
  %v1422 = vmax.f32 %v1420, %v1421
  %v1423 = vsel %vm1205, %v951, -inf
  %v1424 = vmax.f32 %v1422, %v1423
  %v1425 = vsel %vm1205, %v1084, -inf
  %v1426 = vmax.f32 %v1424, %v1425
  %v1427 = vsel %vm1205, %v21, -inf
  %v1428 = vsel %vm1205, %v154, -inf
  %v1429 = vmax.f32 %v1427, %v1428
  %v1430 = vsel %vm1205, %v287, -inf
  %v1431 = vmax.f32 %v1429, %v1430
  %v1432 = vsel %vm1205, %v420, -inf
  %v1433 = vmax.f32 %v1431, %v1432
  %v1434 = vsel %vm1205, %v553, -inf
  %v1435 = vmax.f32 %v1433, %v1434
  %v1436 = vsel %vm1205, %v686, -inf
  %v1437 = vmax.f32 %v1435, %v1436
  %v1438 = vsel %vm1205, %v819, -inf
  %v1439 = vmax.f32 %v1437, %v1438
  %v1440 = vsel %vm1205, %v952, -inf
  %v1441 = vmax.f32 %v1439, %v1440
  %v1442 = vsel %vm1205, %v1085, -inf
  %v1443 = vmax.f32 %v1441, %v1442
  %v1444 = vsel %vm1205, %v22, -inf
  %v1445 = vsel %vm1205, %v155, -inf
  %v1446 = vmax.f32 %v1444, %v1445
  %v1447 = vsel %vm1205, %v288, -inf
  %v1448 = vmax.f32 %v1446, %v1447
  %v1449 = vsel %vm1205, %v421, -inf
  %v1450 = vmax.f32 %v1448, %v1449
  %v1451 = vsel %vm1205, %v554, -inf
  %v1452 = vmax.f32 %v1450, %v1451
  %v1453 = vsel %vm1205, %v687, -inf
  %v1454 = vmax.f32 %v1452, %v1453
  %v1455 = vsel %vm1205, %v820, -inf
  %v1456 = vmax.f32 %v1454, %v1455
  %v1457 = vsel %vm1205, %v953, -inf
  %v1458 = vmax.f32 %v1456, %v1457
  %v1459 = vsel %vm1205, %v1086, -inf
  %v1460 = vmax.f32 %v1458, %v1459
  %v1461 = vsel %vm1205, %v23, -inf
  %v1462 = vsel %vm1205, %v156, -inf
  %v1463 = vmax.f32 %v1461, %v1462
  %v1464 = vsel %vm1205, %v289, -inf
  %v1465 = vmax.f32 %v1463, %v1464
  %v1466 = vsel %vm1205, %v422, -inf
  %v1467 = vmax.f32 %v1465, %v1466
  %v1468 = vsel %vm1205, %v555, -inf
  %v1469 = vmax.f32 %v1467, %v1468
  %v1470 = vsel %vm1205, %v688, -inf
  %v1471 = vmax.f32 %v1469, %v1470
  %v1472 = vsel %vm1205, %v821, -inf
  %v1473 = vmax.f32 %v1471, %v1472
  %v1474 = vsel %vm1205, %v954, -inf
  %v1475 = vmax.f32 %v1473, %v1474
  %v1476 = vsel %vm1205, %v1087, -inf
  %v1477 = vmax.f32 %v1475, %v1476
  %v1478 = vsel %vm1205, %v24, -inf
  %v1479 = vsel %vm1205, %v157, -inf
  %v1480 = vmax.f32 %v1478, %v1479
  %v1481 = vsel %vm1205, %v290, -inf
  %v1482 = vmax.f32 %v1480, %v1481
  %v1483 = vsel %vm1205, %v423, -inf
  %v1484 = vmax.f32 %v1482, %v1483
  %v1485 = vsel %vm1205, %v556, -inf
  %v1486 = vmax.f32 %v1484, %v1485
  %v1487 = vsel %vm1205, %v689, -inf
  %v1488 = vmax.f32 %v1486, %v1487
  %v1489 = vsel %vm1205, %v822, -inf
  %v1490 = vmax.f32 %v1488, %v1489
  %v1491 = vsel %vm1205, %v955, -inf
  %v1492 = vmax.f32 %v1490, %v1491
  %v1493 = vsel %vm1205, %v1088, -inf
  %v1494 = vmax.f32 %v1492, %v1493
  %v1495 = vsel %vm1205, %v25, -inf
  %v1496 = vsel %vm1205, %v158, -inf
  %v1497 = vmax.f32 %v1495, %v1496
  %v1498 = vsel %vm1205, %v291, -inf
  %v1499 = vmax.f32 %v1497, %v1498
  %v1500 = vsel %vm1205, %v424, -inf
  %v1501 = vmax.f32 %v1499, %v1500
  %v1502 = vsel %vm1205, %v557, -inf
  %v1503 = vmax.f32 %v1501, %v1502
  %v1504 = vsel %vm1205, %v690, -inf
  %v1505 = vmax.f32 %v1503, %v1504
  %v1506 = vsel %vm1205, %v823, -inf
  %v1507 = vmax.f32 %v1505, %v1506
  %v1508 = vsel %vm1205, %v956, -inf
  %v1509 = vmax.f32 %v1507, %v1508
  %v1510 = vsel %vm1205, %v1089, -inf
  %v1511 = vmax.f32 %v1509, %v1510
  %v1512 = vsel %vm1205, %v26, -inf
  %v1513 = vsel %vm1205, %v159, -inf
  %v1514 = vmax.f32 %v1512, %v1513
  %v1515 = vsel %vm1205, %v292, -inf
  %v1516 = vmax.f32 %v1514, %v1515
  %v1517 = vsel %vm1205, %v425, -inf
  %v1518 = vmax.f32 %v1516, %v1517
  %v1519 = vsel %vm1205, %v558, -inf
  %v1520 = vmax.f32 %v1518, %v1519
  %v1521 = vsel %vm1205, %v691, -inf
  %v1522 = vmax.f32 %v1520, %v1521
  %v1523 = vsel %vm1205, %v824, -inf
  %v1524 = vmax.f32 %v1522, %v1523
  %v1525 = vsel %vm1205, %v957, -inf
  %v1526 = vmax.f32 %v1524, %v1525
  %v1527 = vsel %vm1205, %v1090, -inf
  %v1528 = vmax.f32 %v1526, %v1527
  %v1529 = vsel %vm1205, %v27, -inf
  %v1530 = vsel %vm1205, %v160, -inf
  %v1531 = vmax.f32 %v1529, %v1530
  %v1532 = vsel %vm1205, %v293, -inf
  %v1533 = vmax.f32 %v1531, %v1532
  %v1534 = vsel %vm1205, %v426, -inf
  %v1535 = vmax.f32 %v1533, %v1534
  %v1536 = vsel %vm1205, %v559, -inf
  %v1537 = vmax.f32 %v1535, %v1536
  %v1538 = vsel %vm1205, %v692, -inf
  %v1539 = vmax.f32 %v1537, %v1538
  %v1540 = vsel %vm1205, %v825, -inf
  %v1541 = vmax.f32 %v1539, %v1540
  %v1542 = vsel %vm1205, %v958, -inf
  %v1543 = vmax.f32 %v1541, %v1542
  %v1544 = vsel %vm1205, %v1091, -inf
  %v1545 = vmax.f32 %v1543, %v1544
  %v1546 = vsel %vm1205, %v28, -inf
  %v1547 = vsel %vm1205, %v161, -inf
  %v1548 = vmax.f32 %v1546, %v1547
  %v1549 = vsel %vm1205, %v294, -inf
  %v1550 = vmax.f32 %v1548, %v1549
  %v1551 = vsel %vm1205, %v427, -inf
  %v1552 = vmax.f32 %v1550, %v1551
  %v1553 = vsel %vm1205, %v560, -inf
  %v1554 = vmax.f32 %v1552, %v1553
  %v1555 = vsel %vm1205, %v693, -inf
  %v1556 = vmax.f32 %v1554, %v1555
  %v1557 = vsel %vm1205, %v826, -inf
  %v1558 = vmax.f32 %v1556, %v1557
  %v1559 = vsel %vm1205, %v959, -inf
  %v1560 = vmax.f32 %v1558, %v1559
  %v1561 = vsel %vm1205, %v1092, -inf
  %v1562 = vmax.f32 %v1560, %v1561
  %v1563 = vsel %vm1205, %v29, -inf
  %v1564 = vsel %vm1205, %v162, -inf
  %v1565 = vmax.f32 %v1563, %v1564
  %v1566 = vsel %vm1205, %v295, -inf
  %v1567 = vmax.f32 %v1565, %v1566
  %v1568 = vsel %vm1205, %v428, -inf
  %v1569 = vmax.f32 %v1567, %v1568
  %v1570 = vsel %vm1205, %v561, -inf
  %v1571 = vmax.f32 %v1569, %v1570
  %v1572 = vsel %vm1205, %v694, -inf
  %v1573 = vmax.f32 %v1571, %v1572
  %v1574 = vsel %vm1205, %v827, -inf
  %v1575 = vmax.f32 %v1573, %v1574
  %v1576 = vsel %vm1205, %v960, -inf
  %v1577 = vmax.f32 %v1575, %v1576
  %v1578 = vsel %vm1205, %v1093, -inf
  %v1579 = vmax.f32 %v1577, %v1578
  %v1580 = vsel %vm1205, %v30, -inf
  %v1581 = vsel %vm1205, %v163, -inf
  %v1582 = vmax.f32 %v1580, %v1581
  %v1583 = vsel %vm1205, %v296, -inf
  %v1584 = vmax.f32 %v1582, %v1583
  %v1585 = vsel %vm1205, %v429, -inf
  %v1586 = vmax.f32 %v1584, %v1585
  %v1587 = vsel %vm1205, %v562, -inf
  %v1588 = vmax.f32 %v1586, %v1587
  %v1589 = vsel %vm1205, %v695, -inf
  %v1590 = vmax.f32 %v1588, %v1589
  %v1591 = vsel %vm1205, %v828, -inf
  %v1592 = vmax.f32 %v1590, %v1591
  %v1593 = vsel %vm1205, %v961, -inf
  %v1594 = vmax.f32 %v1592, %v1593
  %v1595 = vsel %vm1205, %v1094, -inf
  %v1596 = vmax.f32 %v1594, %v1595
  %v1597 = vsel %vm1205, %v31, -inf
  %v1598 = vsel %vm1205, %v164, -inf
  %v1599 = vmax.f32 %v1597, %v1598
  %v1600 = vsel %vm1205, %v297, -inf
  %v1601 = vmax.f32 %v1599, %v1600
  %v1602 = vsel %vm1205, %v430, -inf
  %v1603 = vmax.f32 %v1601, %v1602
  %v1604 = vsel %vm1205, %v563, -inf
  %v1605 = vmax.f32 %v1603, %v1604
  %v1606 = vsel %vm1205, %v696, -inf
  %v1607 = vmax.f32 %v1605, %v1606
  %v1608 = vsel %vm1205, %v829, -inf
  %v1609 = vmax.f32 %v1607, %v1608
  %v1610 = vsel %vm1205, %v962, -inf
  %v1611 = vmax.f32 %v1609, %v1610
  %v1612 = vsel %vm1205, %v1095, -inf
  %v1613 = vmax.f32 %v1611, %v1612
  %v1614 = vsel %vm1205, %v32, -inf
  %v1615 = vsel %vm1205, %v165, -inf
  %v1616 = vmax.f32 %v1614, %v1615
  %v1617 = vsel %vm1205, %v298, -inf
  %v1618 = vmax.f32 %v1616, %v1617
  %v1619 = vsel %vm1205, %v431, -inf
  %v1620 = vmax.f32 %v1618, %v1619
  %v1621 = vsel %vm1205, %v564, -inf
  %v1622 = vmax.f32 %v1620, %v1621
  %v1623 = vsel %vm1205, %v697, -inf
  %v1624 = vmax.f32 %v1622, %v1623
  %v1625 = vsel %vm1205, %v830, -inf
  %v1626 = vmax.f32 %v1624, %v1625
  %v1627 = vsel %vm1205, %v963, -inf
  %v1628 = vmax.f32 %v1626, %v1627
  %v1629 = vsel %vm1205, %v1096, -inf
  %v1630 = vmax.f32 %v1628, %v1629
  %v1631 = vsel %vm1205, %v33, -inf
  %v1632 = vsel %vm1205, %v166, -inf
  %v1633 = vmax.f32 %v1631, %v1632
  %v1634 = vsel %vm1205, %v299, -inf
  %v1635 = vmax.f32 %v1633, %v1634
  %v1636 = vsel %vm1205, %v432, -inf
  %v1637 = vmax.f32 %v1635, %v1636
  %v1638 = vsel %vm1205, %v565, -inf
  %v1639 = vmax.f32 %v1637, %v1638
  %v1640 = vsel %vm1205, %v698, -inf
  %v1641 = vmax.f32 %v1639, %v1640
  %v1642 = vsel %vm1205, %v831, -inf
  %v1643 = vmax.f32 %v1641, %v1642
  %v1644 = vsel %vm1205, %v964, -inf
  %v1645 = vmax.f32 %v1643, %v1644
  %v1646 = vsel %vm1205, %v1097, -inf
  %v1647 = vmax.f32 %v1645, %v1646
  %v1648 = vsel %vm1205, %v34, -inf
  %v1649 = vsel %vm1205, %v167, -inf
  %v1650 = vmax.f32 %v1648, %v1649
  %v1651 = vsel %vm1205, %v300, -inf
  %v1652 = vmax.f32 %v1650, %v1651
  %v1653 = vsel %vm1205, %v433, -inf
  %v1654 = vmax.f32 %v1652, %v1653
  %v1655 = vsel %vm1205, %v566, -inf
  %v1656 = vmax.f32 %v1654, %v1655
  %v1657 = vsel %vm1205, %v699, -inf
  %v1658 = vmax.f32 %v1656, %v1657
  %v1659 = vsel %vm1205, %v832, -inf
  %v1660 = vmax.f32 %v1658, %v1659
  %v1661 = vsel %vm1205, %v965, -inf
  %v1662 = vmax.f32 %v1660, %v1661
  %v1663 = vsel %vm1205, %v1098, -inf
  %v1664 = vmax.f32 %v1662, %v1663
  %v1665 = vsel %vm1205, %v35, -inf
  %v1666 = vsel %vm1205, %v168, -inf
  %v1667 = vmax.f32 %v1665, %v1666
  %v1668 = vsel %vm1205, %v301, -inf
  %v1669 = vmax.f32 %v1667, %v1668
  %v1670 = vsel %vm1205, %v434, -inf
  %v1671 = vmax.f32 %v1669, %v1670
  %v1672 = vsel %vm1205, %v567, -inf
  %v1673 = vmax.f32 %v1671, %v1672
  %v1674 = vsel %vm1205, %v700, -inf
  %v1675 = vmax.f32 %v1673, %v1674
  %v1676 = vsel %vm1205, %v833, -inf
  %v1677 = vmax.f32 %v1675, %v1676
  %v1678 = vsel %vm1205, %v966, -inf
  %v1679 = vmax.f32 %v1677, %v1678
  %v1680 = vsel %vm1205, %v1099, -inf
  %v1681 = vmax.f32 %v1679, %v1680
  %v1682 = vsel %vm1205, %v36, -inf
  %v1683 = vsel %vm1205, %v169, -inf
  %v1684 = vmax.f32 %v1682, %v1683
  %v1685 = vsel %vm1205, %v302, -inf
  %v1686 = vmax.f32 %v1684, %v1685
  %v1687 = vsel %vm1205, %v435, -inf
  %v1688 = vmax.f32 %v1686, %v1687
  %v1689 = vsel %vm1205, %v568, -inf
  %v1690 = vmax.f32 %v1688, %v1689
  %v1691 = vsel %vm1205, %v701, -inf
  %v1692 = vmax.f32 %v1690, %v1691
  %v1693 = vsel %vm1205, %v834, -inf
  %v1694 = vmax.f32 %v1692, %v1693
  %v1695 = vsel %vm1205, %v967, -inf
  %v1696 = vmax.f32 %v1694, %v1695
  %v1697 = vsel %vm1205, %v1100, -inf
  %v1698 = vmax.f32 %v1696, %v1697
  %v1699 = vsel %vm1205, %v37, -inf
  %v1700 = vsel %vm1205, %v170, -inf
  %v1701 = vmax.f32 %v1699, %v1700
  %v1702 = vsel %vm1205, %v303, -inf
  %v1703 = vmax.f32 %v1701, %v1702
  %v1704 = vsel %vm1205, %v436, -inf
  %v1705 = vmax.f32 %v1703, %v1704
  %v1706 = vsel %vm1205, %v569, -inf
  %v1707 = vmax.f32 %v1705, %v1706
  %v1708 = vsel %vm1205, %v702, -inf
  %v1709 = vmax.f32 %v1707, %v1708
  %v1710 = vsel %vm1205, %v835, -inf
  %v1711 = vmax.f32 %v1709, %v1710
  %v1712 = vsel %vm1205, %v968, -inf
  %v1713 = vmax.f32 %v1711, %v1712
  %v1714 = vsel %vm1205, %v1101, -inf
  %v1715 = vmax.f32 %v1713, %v1714
  %v1716 = vsel %vm1205, %v38, -inf
  %v1717 = vsel %vm1205, %v171, -inf
  %v1718 = vmax.f32 %v1716, %v1717
  %v1719 = vsel %vm1205, %v304, -inf
  %v1720 = vmax.f32 %v1718, %v1719
  %v1721 = vsel %vm1205, %v437, -inf
  %v1722 = vmax.f32 %v1720, %v1721
  %v1723 = vsel %vm1205, %v570, -inf
  %v1724 = vmax.f32 %v1722, %v1723
  %v1725 = vsel %vm1205, %v703, -inf
  %v1726 = vmax.f32 %v1724, %v1725
  %v1727 = vsel %vm1205, %v836, -inf
  %v1728 = vmax.f32 %v1726, %v1727
  %v1729 = vsel %vm1205, %v969, -inf
  %v1730 = vmax.f32 %v1728, %v1729
  %v1731 = vsel %vm1205, %v1102, -inf
  %v1732 = vmax.f32 %v1730, %v1731
  %v1733 = vsel %vm1205, %v39, -inf
  %v1734 = vsel %vm1205, %v172, -inf
  %v1735 = vmax.f32 %v1733, %v1734
  %v1736 = vsel %vm1205, %v305, -inf
  %v1737 = vmax.f32 %v1735, %v1736
  %v1738 = vsel %vm1205, %v438, -inf
  %v1739 = vmax.f32 %v1737, %v1738
  %v1740 = vsel %vm1205, %v571, -inf
  %v1741 = vmax.f32 %v1739, %v1740
  %v1742 = vsel %vm1205, %v704, -inf
  %v1743 = vmax.f32 %v1741, %v1742
  %v1744 = vsel %vm1205, %v837, -inf
  %v1745 = vmax.f32 %v1743, %v1744
  %v1746 = vsel %vm1205, %v970, -inf
  %v1747 = vmax.f32 %v1745, %v1746
  %v1748 = vsel %vm1205, %v1103, -inf
  %v1749 = vmax.f32 %v1747, %v1748
  %v1750 = vsel %vm1205, %v40, -inf
  %v1751 = vsel %vm1205, %v173, -inf
  %v1752 = vmax.f32 %v1750, %v1751
  %v1753 = vsel %vm1205, %v306, -inf
  %v1754 = vmax.f32 %v1752, %v1753
  %v1755 = vsel %vm1205, %v439, -inf
  %v1756 = vmax.f32 %v1754, %v1755
  %v1757 = vsel %vm1205, %v572, -inf
  %v1758 = vmax.f32 %v1756, %v1757
  %v1759 = vsel %vm1205, %v705, -inf
  %v1760 = vmax.f32 %v1758, %v1759
  %v1761 = vsel %vm1205, %v838, -inf
  %v1762 = vmax.f32 %v1760, %v1761
  %v1763 = vsel %vm1205, %v971, -inf
  %v1764 = vmax.f32 %v1762, %v1763
  %v1765 = vsel %vm1205, %v1104, -inf
  %v1766 = vmax.f32 %v1764, %v1765
  %v1767 = vsel %vm1205, %v41, -inf
  %v1768 = vsel %vm1205, %v174, -inf
  %v1769 = vmax.f32 %v1767, %v1768
  %v1770 = vsel %vm1205, %v307, -inf
  %v1771 = vmax.f32 %v1769, %v1770
  %v1772 = vsel %vm1205, %v440, -inf
  %v1773 = vmax.f32 %v1771, %v1772
  %v1774 = vsel %vm1205, %v573, -inf
  %v1775 = vmax.f32 %v1773, %v1774
  %v1776 = vsel %vm1205, %v706, -inf
  %v1777 = vmax.f32 %v1775, %v1776
  %v1778 = vsel %vm1205, %v839, -inf
  %v1779 = vmax.f32 %v1777, %v1778
  %v1780 = vsel %vm1205, %v972, -inf
  %v1781 = vmax.f32 %v1779, %v1780
  %v1782 = vsel %vm1205, %v1105, -inf
  %v1783 = vmax.f32 %v1781, %v1782
  %v1784 = vsel %vm1205, %v42, -inf
  %v1785 = vsel %vm1205, %v175, -inf
  %v1786 = vmax.f32 %v1784, %v1785
  %v1787 = vsel %vm1205, %v308, -inf
  %v1788 = vmax.f32 %v1786, %v1787
  %v1789 = vsel %vm1205, %v441, -inf
  %v1790 = vmax.f32 %v1788, %v1789
  %v1791 = vsel %vm1205, %v574, -inf
  %v1792 = vmax.f32 %v1790, %v1791
  %v1793 = vsel %vm1205, %v707, -inf
  %v1794 = vmax.f32 %v1792, %v1793
  %v1795 = vsel %vm1205, %v840, -inf
  %v1796 = vmax.f32 %v1794, %v1795
  %v1797 = vsel %vm1205, %v973, -inf
  %v1798 = vmax.f32 %v1796, %v1797
  %v1799 = vsel %vm1205, %v1106, -inf
  %v1800 = vmax.f32 %v1798, %v1799
  %v1801 = vsel %vm1205, %v43, -inf
  %v1802 = vsel %vm1205, %v176, -inf
  %v1803 = vmax.f32 %v1801, %v1802
  %v1804 = vsel %vm1205, %v309, -inf
  %v1805 = vmax.f32 %v1803, %v1804
  %v1806 = vsel %vm1205, %v442, -inf
  %v1807 = vmax.f32 %v1805, %v1806
  %v1808 = vsel %vm1205, %v575, -inf
  %v1809 = vmax.f32 %v1807, %v1808
  %v1810 = vsel %vm1205, %v708, -inf
  %v1811 = vmax.f32 %v1809, %v1810
  %v1812 = vsel %vm1205, %v841, -inf
  %v1813 = vmax.f32 %v1811, %v1812
  %v1814 = vsel %vm1205, %v974, -inf
  %v1815 = vmax.f32 %v1813, %v1814
  %v1816 = vsel %vm1205, %v1107, -inf
  %v1817 = vmax.f32 %v1815, %v1816
  %v1818 = vsel %vm1205, %v44, -inf
  %v1819 = vsel %vm1205, %v177, -inf
  %v1820 = vmax.f32 %v1818, %v1819
  %v1821 = vsel %vm1205, %v310, -inf
  %v1822 = vmax.f32 %v1820, %v1821
  %v1823 = vsel %vm1205, %v443, -inf
  %v1824 = vmax.f32 %v1822, %v1823
  %v1825 = vsel %vm1205, %v576, -inf
  %v1826 = vmax.f32 %v1824, %v1825
  %v1827 = vsel %vm1205, %v709, -inf
  %v1828 = vmax.f32 %v1826, %v1827
  %v1829 = vsel %vm1205, %v842, -inf
  %v1830 = vmax.f32 %v1828, %v1829
  %v1831 = vsel %vm1205, %v975, -inf
  %v1832 = vmax.f32 %v1830, %v1831
  %v1833 = vsel %vm1205, %v1108, -inf
  %v1834 = vmax.f32 %v1832, %v1833
  %v1835 = vsel %vm1205, %v45, -inf
  %v1836 = vsel %vm1205, %v178, -inf
  %v1837 = vmax.f32 %v1835, %v1836
  %v1838 = vsel %vm1205, %v311, -inf
  %v1839 = vmax.f32 %v1837, %v1838
  %v1840 = vsel %vm1205, %v444, -inf
  %v1841 = vmax.f32 %v1839, %v1840
  %v1842 = vsel %vm1205, %v577, -inf
  %v1843 = vmax.f32 %v1841, %v1842
  %v1844 = vsel %vm1205, %v710, -inf
  %v1845 = vmax.f32 %v1843, %v1844
  %v1846 = vsel %vm1205, %v843, -inf
  %v1847 = vmax.f32 %v1845, %v1846
  %v1848 = vsel %vm1205, %v976, -inf
  %v1849 = vmax.f32 %v1847, %v1848
  %v1850 = vsel %vm1205, %v1109, -inf
  %v1851 = vmax.f32 %v1849, %v1850
  %v1852 = vsel %vm1205, %v46, -inf
  %v1853 = vsel %vm1205, %v179, -inf
  %v1854 = vmax.f32 %v1852, %v1853
  %v1855 = vsel %vm1205, %v312, -inf
  %v1856 = vmax.f32 %v1854, %v1855
  %v1857 = vsel %vm1205, %v445, -inf
  %v1858 = vmax.f32 %v1856, %v1857
  %v1859 = vsel %vm1205, %v578, -inf
  %v1860 = vmax.f32 %v1858, %v1859
  %v1861 = vsel %vm1205, %v711, -inf
  %v1862 = vmax.f32 %v1860, %v1861
  %v1863 = vsel %vm1205, %v844, -inf
  %v1864 = vmax.f32 %v1862, %v1863
  %v1865 = vsel %vm1205, %v977, -inf
  %v1866 = vmax.f32 %v1864, %v1865
  %v1867 = vsel %vm1205, %v1110, -inf
  %v1868 = vmax.f32 %v1866, %v1867
  %v1869 = vsel %vm1205, %v47, -inf
  %v1870 = vsel %vm1205, %v180, -inf
  %v1871 = vmax.f32 %v1869, %v1870
  %v1872 = vsel %vm1205, %v313, -inf
  %v1873 = vmax.f32 %v1871, %v1872
  %v1874 = vsel %vm1205, %v446, -inf
  %v1875 = vmax.f32 %v1873, %v1874
  %v1876 = vsel %vm1205, %v579, -inf
  %v1877 = vmax.f32 %v1875, %v1876
  %v1878 = vsel %vm1205, %v712, -inf
  %v1879 = vmax.f32 %v1877, %v1878
  %v1880 = vsel %vm1205, %v845, -inf
  %v1881 = vmax.f32 %v1879, %v1880
  %v1882 = vsel %vm1205, %v978, -inf
  %v1883 = vmax.f32 %v1881, %v1882
  %v1884 = vsel %vm1205, %v1111, -inf
  %v1885 = vmax.f32 %v1883, %v1884
  %v1886 = vsel %vm1205, %v48, -inf
  %v1887 = vsel %vm1205, %v181, -inf
  %v1888 = vmax.f32 %v1886, %v1887
  %v1889 = vsel %vm1205, %v314, -inf
  %v1890 = vmax.f32 %v1888, %v1889
  %v1891 = vsel %vm1205, %v447, -inf
  %v1892 = vmax.f32 %v1890, %v1891
  %v1893 = vsel %vm1205, %v580, -inf
  %v1894 = vmax.f32 %v1892, %v1893
  %v1895 = vsel %vm1205, %v713, -inf
  %v1896 = vmax.f32 %v1894, %v1895
  %v1897 = vsel %vm1205, %v846, -inf
  %v1898 = vmax.f32 %v1896, %v1897
  %v1899 = vsel %vm1205, %v979, -inf
  %v1900 = vmax.f32 %v1898, %v1899
  %v1901 = vsel %vm1205, %v1112, -inf
  %v1902 = vmax.f32 %v1900, %v1901
  %v1903 = vsel %vm1205, %v49, -inf
  %v1904 = vsel %vm1205, %v182, -inf
  %v1905 = vmax.f32 %v1903, %v1904
  %v1906 = vsel %vm1205, %v315, -inf
  %v1907 = vmax.f32 %v1905, %v1906
  %v1908 = vsel %vm1205, %v448, -inf
  %v1909 = vmax.f32 %v1907, %v1908
  %v1910 = vsel %vm1205, %v581, -inf
  %v1911 = vmax.f32 %v1909, %v1910
  %v1912 = vsel %vm1205, %v714, -inf
  %v1913 = vmax.f32 %v1911, %v1912
  %v1914 = vsel %vm1205, %v847, -inf
  %v1915 = vmax.f32 %v1913, %v1914
  %v1916 = vsel %vm1205, %v980, -inf
  %v1917 = vmax.f32 %v1915, %v1916
  %v1918 = vsel %vm1205, %v1113, -inf
  %v1919 = vmax.f32 %v1917, %v1918
  %v1920 = vsel %vm1205, %v50, -inf
  %v1921 = vsel %vm1205, %v183, -inf
  %v1922 = vmax.f32 %v1920, %v1921
  %v1923 = vsel %vm1205, %v316, -inf
  %v1924 = vmax.f32 %v1922, %v1923
  %v1925 = vsel %vm1205, %v449, -inf
  %v1926 = vmax.f32 %v1924, %v1925
  %v1927 = vsel %vm1205, %v582, -inf
  %v1928 = vmax.f32 %v1926, %v1927
  %v1929 = vsel %vm1205, %v715, -inf
  %v1930 = vmax.f32 %v1928, %v1929
  %v1931 = vsel %vm1205, %v848, -inf
  %v1932 = vmax.f32 %v1930, %v1931
  %v1933 = vsel %vm1205, %v981, -inf
  %v1934 = vmax.f32 %v1932, %v1933
  %v1935 = vsel %vm1205, %v1114, -inf
  %v1936 = vmax.f32 %v1934, %v1935
  %v1937 = vsel %vm1205, %v51, -inf
  %v1938 = vsel %vm1205, %v184, -inf
  %v1939 = vmax.f32 %v1937, %v1938
  %v1940 = vsel %vm1205, %v317, -inf
  %v1941 = vmax.f32 %v1939, %v1940
  %v1942 = vsel %vm1205, %v450, -inf
  %v1943 = vmax.f32 %v1941, %v1942
  %v1944 = vsel %vm1205, %v583, -inf
  %v1945 = vmax.f32 %v1943, %v1944
  %v1946 = vsel %vm1205, %v716, -inf
  %v1947 = vmax.f32 %v1945, %v1946
  %v1948 = vsel %vm1205, %v849, -inf
  %v1949 = vmax.f32 %v1947, %v1948
  %v1950 = vsel %vm1205, %v982, -inf
  %v1951 = vmax.f32 %v1949, %v1950
  %v1952 = vsel %vm1205, %v1115, -inf
  %v1953 = vmax.f32 %v1951, %v1952
  %v1954 = vsel %vm1205, %v52, -inf
  %v1955 = vsel %vm1205, %v185, -inf
  %v1956 = vmax.f32 %v1954, %v1955
  %v1957 = vsel %vm1205, %v318, -inf
  %v1958 = vmax.f32 %v1956, %v1957
  %v1959 = vsel %vm1205, %v451, -inf
  %v1960 = vmax.f32 %v1958, %v1959
  %v1961 = vsel %vm1205, %v584, -inf
  %v1962 = vmax.f32 %v1960, %v1961
  %v1963 = vsel %vm1205, %v717, -inf
  %v1964 = vmax.f32 %v1962, %v1963
  %v1965 = vsel %vm1205, %v850, -inf
  %v1966 = vmax.f32 %v1964, %v1965
  %v1967 = vsel %vm1205, %v983, -inf
  %v1968 = vmax.f32 %v1966, %v1967
  %v1969 = vsel %vm1205, %v1116, -inf
  %v1970 = vmax.f32 %v1968, %v1969
  %v1971 = vsel %vm1205, %v53, -inf
  %v1972 = vsel %vm1205, %v186, -inf
  %v1973 = vmax.f32 %v1971, %v1972
  %v1974 = vsel %vm1205, %v319, -inf
  %v1975 = vmax.f32 %v1973, %v1974
  %v1976 = vsel %vm1205, %v452, -inf
  %v1977 = vmax.f32 %v1975, %v1976
  %v1978 = vsel %vm1205, %v585, -inf
  %v1979 = vmax.f32 %v1977, %v1978
  %v1980 = vsel %vm1205, %v718, -inf
  %v1981 = vmax.f32 %v1979, %v1980
  %v1982 = vsel %vm1205, %v851, -inf
  %v1983 = vmax.f32 %v1981, %v1982
  %v1984 = vsel %vm1205, %v984, -inf
  %v1985 = vmax.f32 %v1983, %v1984
  %v1986 = vsel %vm1205, %v1117, -inf
  %v1987 = vmax.f32 %v1985, %v1986
  %v1988 = vsel %vm1205, %v54, -inf
  %v1989 = vsel %vm1205, %v187, -inf
  %v1990 = vmax.f32 %v1988, %v1989
  %v1991 = vsel %vm1205, %v320, -inf
  %v1992 = vmax.f32 %v1990, %v1991
  %v1993 = vsel %vm1205, %v453, -inf
  %v1994 = vmax.f32 %v1992, %v1993
  %v1995 = vsel %vm1205, %v586, -inf
  %v1996 = vmax.f32 %v1994, %v1995
  %v1997 = vsel %vm1205, %v719, -inf
  %v1998 = vmax.f32 %v1996, %v1997
  %v1999 = vsel %vm1205, %v852, -inf
  %v2000 = vmax.f32 %v1998, %v1999
  %v2001 = vsel %vm1205, %v985, -inf
  %v2002 = vmax.f32 %v2000, %v2001
  %v2003 = vsel %vm1205, %v1118, -inf
  %v2004 = vmax.f32 %v2002, %v2003
  %v2005 = vsel %vm1205, %v55, -inf
  %v2006 = vsel %vm1205, %v188, -inf
  %v2007 = vmax.f32 %v2005, %v2006
  %v2008 = vsel %vm1205, %v321, -inf
  %v2009 = vmax.f32 %v2007, %v2008
  %v2010 = vsel %vm1205, %v454, -inf
  %v2011 = vmax.f32 %v2009, %v2010
  %v2012 = vsel %vm1205, %v587, -inf
  %v2013 = vmax.f32 %v2011, %v2012
  %v2014 = vsel %vm1205, %v720, -inf
  %v2015 = vmax.f32 %v2013, %v2014
  %v2016 = vsel %vm1205, %v853, -inf
  %v2017 = vmax.f32 %v2015, %v2016
  %v2018 = vsel %vm1205, %v986, -inf
  %v2019 = vmax.f32 %v2017, %v2018
  %v2020 = vsel %vm1205, %v1119, -inf
  %v2021 = vmax.f32 %v2019, %v2020
  %v2022 = vsel %vm1205, %v56, -inf
  %v2023 = vsel %vm1205, %v189, -inf
  %v2024 = vmax.f32 %v2022, %v2023
  %v2025 = vsel %vm1205, %v322, -inf
  %v2026 = vmax.f32 %v2024, %v2025
  %v2027 = vsel %vm1205, %v455, -inf
  %v2028 = vmax.f32 %v2026, %v2027
  %v2029 = vsel %vm1205, %v588, -inf
  %v2030 = vmax.f32 %v2028, %v2029
  %v2031 = vsel %vm1205, %v721, -inf
  %v2032 = vmax.f32 %v2030, %v2031
  %v2033 = vsel %vm1205, %v854, -inf
  %v2034 = vmax.f32 %v2032, %v2033
  %v2035 = vsel %vm1205, %v987, -inf
  %v2036 = vmax.f32 %v2034, %v2035
  %v2037 = vsel %vm1205, %v1120, -inf
  %v2038 = vmax.f32 %v2036, %v2037
  %v2039 = vsel %vm1205, %v57, -inf
  %v2040 = vsel %vm1205, %v190, -inf
  %v2041 = vmax.f32 %v2039, %v2040
  %v2042 = vsel %vm1205, %v323, -inf
  %v2043 = vmax.f32 %v2041, %v2042
  %v2044 = vsel %vm1205, %v456, -inf
  %v2045 = vmax.f32 %v2043, %v2044
  %v2046 = vsel %vm1205, %v589, -inf
  %v2047 = vmax.f32 %v2045, %v2046
  %v2048 = vsel %vm1205, %v722, -inf
  %v2049 = vmax.f32 %v2047, %v2048
  %v2050 = vsel %vm1205, %v855, -inf
  %v2051 = vmax.f32 %v2049, %v2050
  %v2052 = vsel %vm1205, %v988, -inf
  %v2053 = vmax.f32 %v2051, %v2052
  %v2054 = vsel %vm1205, %v1121, -inf
  %v2055 = vmax.f32 %v2053, %v2054
  %v2056 = vsel %vm1205, %v58, -inf
  %v2057 = vsel %vm1205, %v191, -inf
  %v2058 = vmax.f32 %v2056, %v2057
  %v2059 = vsel %vm1205, %v324, -inf
  %v2060 = vmax.f32 %v2058, %v2059
  %v2061 = vsel %vm1205, %v457, -inf
  %v2062 = vmax.f32 %v2060, %v2061
  %v2063 = vsel %vm1205, %v590, -inf
  %v2064 = vmax.f32 %v2062, %v2063
  %v2065 = vsel %vm1205, %v723, -inf
  %v2066 = vmax.f32 %v2064, %v2065
  %v2067 = vsel %vm1205, %v856, -inf
  %v2068 = vmax.f32 %v2066, %v2067
  %v2069 = vsel %vm1205, %v989, -inf
  %v2070 = vmax.f32 %v2068, %v2069
  %v2071 = vsel %vm1205, %v1122, -inf
  %v2072 = vmax.f32 %v2070, %v2071
  %v2073 = vsel %vm1205, %v59, -inf
  %v2074 = vsel %vm1205, %v192, -inf
  %v2075 = vmax.f32 %v2073, %v2074
  %v2076 = vsel %vm1205, %v325, -inf
  %v2077 = vmax.f32 %v2075, %v2076
  %v2078 = vsel %vm1205, %v458, -inf
  %v2079 = vmax.f32 %v2077, %v2078
  %v2080 = vsel %vm1205, %v591, -inf
  %v2081 = vmax.f32 %v2079, %v2080
  %v2082 = vsel %vm1205, %v724, -inf
  %v2083 = vmax.f32 %v2081, %v2082
  %v2084 = vsel %vm1205, %v857, -inf
  %v2085 = vmax.f32 %v2083, %v2084
  %v2086 = vsel %vm1205, %v990, -inf
  %v2087 = vmax.f32 %v2085, %v2086
  %v2088 = vsel %vm1205, %v1123, -inf
  %v2089 = vmax.f32 %v2087, %v2088
  %v2090 = vsel %vm1205, %v60, -inf
  %v2091 = vsel %vm1205, %v193, -inf
  %v2092 = vmax.f32 %v2090, %v2091
  %v2093 = vsel %vm1205, %v326, -inf
  %v2094 = vmax.f32 %v2092, %v2093
  %v2095 = vsel %vm1205, %v459, -inf
  %v2096 = vmax.f32 %v2094, %v2095
  %v2097 = vsel %vm1205, %v592, -inf
  %v2098 = vmax.f32 %v2096, %v2097
  %v2099 = vsel %vm1205, %v725, -inf
  %v2100 = vmax.f32 %v2098, %v2099
  %v2101 = vsel %vm1205, %v858, -inf
  %v2102 = vmax.f32 %v2100, %v2101
  %v2103 = vsel %vm1205, %v991, -inf
  %v2104 = vmax.f32 %v2102, %v2103
  %v2105 = vsel %vm1205, %v1124, -inf
  %v2106 = vmax.f32 %v2104, %v2105
  %v2107 = vsel %vm1205, %v61, -inf
  %v2108 = vsel %vm1205, %v194, -inf
  %v2109 = vmax.f32 %v2107, %v2108
  %v2110 = vsel %vm1205, %v327, -inf
  %v2111 = vmax.f32 %v2109, %v2110
  %v2112 = vsel %vm1205, %v460, -inf
  %v2113 = vmax.f32 %v2111, %v2112
  %v2114 = vsel %vm1205, %v593, -inf
  %v2115 = vmax.f32 %v2113, %v2114
  %v2116 = vsel %vm1205, %v726, -inf
  %v2117 = vmax.f32 %v2115, %v2116
  %v2118 = vsel %vm1205, %v859, -inf
  %v2119 = vmax.f32 %v2117, %v2118
  %v2120 = vsel %vm1205, %v992, -inf
  %v2121 = vmax.f32 %v2119, %v2120
  %v2122 = vsel %vm1205, %v1125, -inf
  %v2123 = vmax.f32 %v2121, %v2122
  %v2124 = vsel %vm1205, %v62, -inf
  %v2125 = vsel %vm1205, %v195, -inf
  %v2126 = vmax.f32 %v2124, %v2125
  %v2127 = vsel %vm1205, %v328, -inf
  %v2128 = vmax.f32 %v2126, %v2127
  %v2129 = vsel %vm1205, %v461, -inf
  %v2130 = vmax.f32 %v2128, %v2129
  %v2131 = vsel %vm1205, %v594, -inf
  %v2132 = vmax.f32 %v2130, %v2131
  %v2133 = vsel %vm1205, %v727, -inf
  %v2134 = vmax.f32 %v2132, %v2133
  %v2135 = vsel %vm1205, %v860, -inf
  %v2136 = vmax.f32 %v2134, %v2135
  %v2137 = vsel %vm1205, %v993, -inf
  %v2138 = vmax.f32 %v2136, %v2137
  %v2139 = vsel %vm1205, %v1126, -inf
  %v2140 = vmax.f32 %v2138, %v2139
  %v2141 = vsel %vm1205, %v63, -inf
  %v2142 = vsel %vm1205, %v196, -inf
  %v2143 = vmax.f32 %v2141, %v2142
  %v2144 = vsel %vm1205, %v329, -inf
  %v2145 = vmax.f32 %v2143, %v2144
  %v2146 = vsel %vm1205, %v462, -inf
  %v2147 = vmax.f32 %v2145, %v2146
  %v2148 = vsel %vm1205, %v595, -inf
  %v2149 = vmax.f32 %v2147, %v2148
  %v2150 = vsel %vm1205, %v728, -inf
  %v2151 = vmax.f32 %v2149, %v2150
  %v2152 = vsel %vm1205, %v861, -inf
  %v2153 = vmax.f32 %v2151, %v2152
  %v2154 = vsel %vm1205, %v994, -inf
  %v2155 = vmax.f32 %v2153, %v2154
  %v2156 = vsel %vm1205, %v1127, -inf
  %v2157 = vmax.f32 %v2155, %v2156
  %v2158 = vsel %vm1205, %v64, -inf
  %v2159 = vsel %vm1205, %v197, -inf
  %v2160 = vmax.f32 %v2158, %v2159
  %v2161 = vsel %vm1205, %v330, -inf
  %v2162 = vmax.f32 %v2160, %v2161
  %v2163 = vsel %vm1205, %v463, -inf
  %v2164 = vmax.f32 %v2162, %v2163
  %v2165 = vsel %vm1205, %v596, -inf
  %v2166 = vmax.f32 %v2164, %v2165
  %v2167 = vsel %vm1205, %v729, -inf
  %v2168 = vmax.f32 %v2166, %v2167
  %v2169 = vsel %vm1205, %v862, -inf
  %v2170 = vmax.f32 %v2168, %v2169
  %v2171 = vsel %vm1205, %v995, -inf
  %v2172 = vmax.f32 %v2170, %v2171
  %v2173 = vsel %vm1205, %v1128, -inf
  %v2174 = vmax.f32 %v2172, %v2173
  %v2175 = vsel %vm1205, %v65, -inf
  %v2176 = vsel %vm1205, %v198, -inf
  %v2177 = vmax.f32 %v2175, %v2176
  %v2178 = vsel %vm1205, %v331, -inf
  %v2179 = vmax.f32 %v2177, %v2178
  %v2180 = vsel %vm1205, %v464, -inf
  %v2181 = vmax.f32 %v2179, %v2180
  %v2182 = vsel %vm1205, %v597, -inf
  %v2183 = vmax.f32 %v2181, %v2182
  %v2184 = vsel %vm1205, %v730, -inf
  %v2185 = vmax.f32 %v2183, %v2184
  %v2186 = vsel %vm1205, %v863, -inf
  %v2187 = vmax.f32 %v2185, %v2186
  %v2188 = vsel %vm1205, %v996, -inf
  %v2189 = vmax.f32 %v2187, %v2188
  %v2190 = vsel %vm1205, %v1129, -inf
  %v2191 = vmax.f32 %v2189, %v2190
  %v2192 = vsel %vm1205, %v66, -inf
  %v2193 = vsel %vm1205, %v199, -inf
  %v2194 = vmax.f32 %v2192, %v2193
  %v2195 = vsel %vm1205, %v332, -inf
  %v2196 = vmax.f32 %v2194, %v2195
  %v2197 = vsel %vm1205, %v465, -inf
  %v2198 = vmax.f32 %v2196, %v2197
  %v2199 = vsel %vm1205, %v598, -inf
  %v2200 = vmax.f32 %v2198, %v2199
  %v2201 = vsel %vm1205, %v731, -inf
  %v2202 = vmax.f32 %v2200, %v2201
  %v2203 = vsel %vm1205, %v864, -inf
  %v2204 = vmax.f32 %v2202, %v2203
  %v2205 = vsel %vm1205, %v997, -inf
  %v2206 = vmax.f32 %v2204, %v2205
  %v2207 = vsel %vm1205, %v1130, -inf
  %v2208 = vmax.f32 %v2206, %v2207
  %v2209 = vsel %vm1205, %v67, -inf
  %v2210 = vsel %vm1205, %v200, -inf
  %v2211 = vmax.f32 %v2209, %v2210
  %v2212 = vsel %vm1205, %v333, -inf
  %v2213 = vmax.f32 %v2211, %v2212
  %v2214 = vsel %vm1205, %v466, -inf
  %v2215 = vmax.f32 %v2213, %v2214
  %v2216 = vsel %vm1205, %v599, -inf
  %v2217 = vmax.f32 %v2215, %v2216
  %v2218 = vsel %vm1205, %v732, -inf
  %v2219 = vmax.f32 %v2217, %v2218
  %v2220 = vsel %vm1205, %v865, -inf
  %v2221 = vmax.f32 %v2219, %v2220
  %v2222 = vsel %vm1205, %v998, -inf
  %v2223 = vmax.f32 %v2221, %v2222
  %v2224 = vsel %vm1205, %v1131, -inf
  %v2225 = vmax.f32 %v2223, %v2224
  %v2226 = vsel %vm1205, %v68, -inf
  %v2227 = vsel %vm1205, %v201, -inf
  %v2228 = vmax.f32 %v2226, %v2227
  %v2229 = vsel %vm1205, %v334, -inf
  %v2230 = vmax.f32 %v2228, %v2229
  %v2231 = vsel %vm1205, %v467, -inf
  %v2232 = vmax.f32 %v2230, %v2231
  %v2233 = vsel %vm1205, %v600, -inf
  %v2234 = vmax.f32 %v2232, %v2233
  %v2235 = vsel %vm1205, %v733, -inf
  %v2236 = vmax.f32 %v2234, %v2235
  %v2237 = vsel %vm1205, %v866, -inf
  %v2238 = vmax.f32 %v2236, %v2237
  %v2239 = vsel %vm1205, %v999, -inf
  %v2240 = vmax.f32 %v2238, %v2239
  %v2241 = vsel %vm1205, %v1132, -inf
  %v2242 = vmax.f32 %v2240, %v2241
  %v2243 = vsel %vm1205, %v69, -inf
  %v2244 = vsel %vm1205, %v202, -inf
  %v2245 = vmax.f32 %v2243, %v2244
  %v2246 = vsel %vm1205, %v335, -inf
  %v2247 = vmax.f32 %v2245, %v2246
  %v2248 = vsel %vm1205, %v468, -inf
  %v2249 = vmax.f32 %v2247, %v2248
  %v2250 = vsel %vm1205, %v601, -inf
  %v2251 = vmax.f32 %v2249, %v2250
  %v2252 = vsel %vm1205, %v734, -inf
  %v2253 = vmax.f32 %v2251, %v2252
  %v2254 = vsel %vm1205, %v867, -inf
  %v2255 = vmax.f32 %v2253, %v2254
  %v2256 = vsel %vm1205, %v1000, -inf
  %v2257 = vmax.f32 %v2255, %v2256
  %v2258 = vsel %vm1205, %v1133, -inf
  %v2259 = vmax.f32 %v2257, %v2258
  %v2260 = vsel %vm1205, %v70, -inf
  %v2261 = vsel %vm1205, %v203, -inf
  %v2262 = vmax.f32 %v2260, %v2261
  %v2263 = vsel %vm1205, %v336, -inf
  %v2264 = vmax.f32 %v2262, %v2263
  %v2265 = vsel %vm1205, %v469, -inf
  %v2266 = vmax.f32 %v2264, %v2265
  %v2267 = vsel %vm1205, %v602, -inf
  %v2268 = vmax.f32 %v2266, %v2267
  %v2269 = vsel %vm1205, %v735, -inf
  %v2270 = vmax.f32 %v2268, %v2269
  %v2271 = vsel %vm1205, %v868, -inf
  %v2272 = vmax.f32 %v2270, %v2271
  %v2273 = vsel %vm1205, %v1001, -inf
  %v2274 = vmax.f32 %v2272, %v2273
  %v2275 = vsel %vm1205, %v1134, -inf
  %v2276 = vmax.f32 %v2274, %v2275
  %v2277 = vsel %vm1205, %v71, -inf
  %v2278 = vsel %vm1205, %v204, -inf
  %v2279 = vmax.f32 %v2277, %v2278
  %v2280 = vsel %vm1205, %v337, -inf
  %v2281 = vmax.f32 %v2279, %v2280
  %v2282 = vsel %vm1205, %v470, -inf
  %v2283 = vmax.f32 %v2281, %v2282
  %v2284 = vsel %vm1205, %v603, -inf
  %v2285 = vmax.f32 %v2283, %v2284
  %v2286 = vsel %vm1205, %v736, -inf
  %v2287 = vmax.f32 %v2285, %v2286
  %v2288 = vsel %vm1205, %v869, -inf
  %v2289 = vmax.f32 %v2287, %v2288
  %v2290 = vsel %vm1205, %v1002, -inf
  %v2291 = vmax.f32 %v2289, %v2290
  %v2292 = vsel %vm1205, %v1135, -inf
  %v2293 = vmax.f32 %v2291, %v2292
  %v2294 = vsel %vm1205, %v72, -inf
  %v2295 = vsel %vm1205, %v205, -inf
  %v2296 = vmax.f32 %v2294, %v2295
  %v2297 = vsel %vm1205, %v338, -inf
  %v2298 = vmax.f32 %v2296, %v2297
  %v2299 = vsel %vm1205, %v471, -inf
  %v2300 = vmax.f32 %v2298, %v2299
  %v2301 = vsel %vm1205, %v604, -inf
  %v2302 = vmax.f32 %v2300, %v2301
  %v2303 = vsel %vm1205, %v737, -inf
  %v2304 = vmax.f32 %v2302, %v2303
  %v2305 = vsel %vm1205, %v870, -inf
  %v2306 = vmax.f32 %v2304, %v2305
  %v2307 = vsel %vm1205, %v1003, -inf
  %v2308 = vmax.f32 %v2306, %v2307
  %v2309 = vsel %vm1205, %v1136, -inf
  %v2310 = vmax.f32 %v2308, %v2309
  %v2311 = vsel %vm1205, %v73, -inf
  %v2312 = vsel %vm1205, %v206, -inf
  %v2313 = vmax.f32 %v2311, %v2312
  %v2314 = vsel %vm1205, %v339, -inf
  %v2315 = vmax.f32 %v2313, %v2314
  %v2316 = vsel %vm1205, %v472, -inf
  %v2317 = vmax.f32 %v2315, %v2316
  %v2318 = vsel %vm1205, %v605, -inf
  %v2319 = vmax.f32 %v2317, %v2318
  %v2320 = vsel %vm1205, %v738, -inf
  %v2321 = vmax.f32 %v2319, %v2320
  %v2322 = vsel %vm1205, %v871, -inf
  %v2323 = vmax.f32 %v2321, %v2322
  %v2324 = vsel %vm1205, %v1004, -inf
  %v2325 = vmax.f32 %v2323, %v2324
  %v2326 = vsel %vm1205, %v1137, -inf
  %v2327 = vmax.f32 %v2325, %v2326
  %v2328 = vsel %vm1205, %v74, -inf
  %v2329 = vsel %vm1205, %v207, -inf
  %v2330 = vmax.f32 %v2328, %v2329
  %v2331 = vsel %vm1205, %v340, -inf
  %v2332 = vmax.f32 %v2330, %v2331
  %v2333 = vsel %vm1205, %v473, -inf
  %v2334 = vmax.f32 %v2332, %v2333
  %v2335 = vsel %vm1205, %v606, -inf
  %v2336 = vmax.f32 %v2334, %v2335
  %v2337 = vsel %vm1205, %v739, -inf
  %v2338 = vmax.f32 %v2336, %v2337
  %v2339 = vsel %vm1205, %v872, -inf
  %v2340 = vmax.f32 %v2338, %v2339
  %v2341 = vsel %vm1205, %v1005, -inf
  %v2342 = vmax.f32 %v2340, %v2341
  %v2343 = vsel %vm1205, %v1138, -inf
  %v2344 = vmax.f32 %v2342, %v2343
  %v2345 = vsel %vm1205, %v75, -inf
  %v2346 = vsel %vm1205, %v208, -inf
  %v2347 = vmax.f32 %v2345, %v2346
  %v2348 = vsel %vm1205, %v341, -inf
  %v2349 = vmax.f32 %v2347, %v2348
  %v2350 = vsel %vm1205, %v474, -inf
  %v2351 = vmax.f32 %v2349, %v2350
  %v2352 = vsel %vm1205, %v607, -inf
  %v2353 = vmax.f32 %v2351, %v2352
  %v2354 = vsel %vm1205, %v740, -inf
  %v2355 = vmax.f32 %v2353, %v2354
  %v2356 = vsel %vm1205, %v873, -inf
  %v2357 = vmax.f32 %v2355, %v2356
  %v2358 = vsel %vm1205, %v1006, -inf
  %v2359 = vmax.f32 %v2357, %v2358
  %v2360 = vsel %vm1205, %v1139, -inf
  %v2361 = vmax.f32 %v2359, %v2360
  %v2362 = vsel %vm1205, %v76, -inf
  %v2363 = vsel %vm1205, %v209, -inf
  %v2364 = vmax.f32 %v2362, %v2363
  %v2365 = vsel %vm1205, %v342, -inf
  %v2366 = vmax.f32 %v2364, %v2365
  %v2367 = vsel %vm1205, %v475, -inf
  %v2368 = vmax.f32 %v2366, %v2367
  %v2369 = vsel %vm1205, %v608, -inf
  %v2370 = vmax.f32 %v2368, %v2369
  %v2371 = vsel %vm1205, %v741, -inf
  %v2372 = vmax.f32 %v2370, %v2371
  %v2373 = vsel %vm1205, %v874, -inf
  %v2374 = vmax.f32 %v2372, %v2373
  %v2375 = vsel %vm1205, %v1007, -inf
  %v2376 = vmax.f32 %v2374, %v2375
  %v2377 = vsel %vm1205, %v1140, -inf
  %v2378 = vmax.f32 %v2376, %v2377
  %v2379 = vsel %vm1205, %v77, -inf
  %v2380 = vsel %vm1205, %v210, -inf
  %v2381 = vmax.f32 %v2379, %v2380
  %v2382 = vsel %vm1205, %v343, -inf
  %v2383 = vmax.f32 %v2381, %v2382
  %v2384 = vsel %vm1205, %v476, -inf
  %v2385 = vmax.f32 %v2383, %v2384
  %v2386 = vsel %vm1205, %v609, -inf
  %v2387 = vmax.f32 %v2385, %v2386
  %v2388 = vsel %vm1205, %v742, -inf
  %v2389 = vmax.f32 %v2387, %v2388
  %v2390 = vsel %vm1205, %v875, -inf
  %v2391 = vmax.f32 %v2389, %v2390
  %v2392 = vsel %vm1205, %v1008, -inf
  %v2393 = vmax.f32 %v2391, %v2392
  %v2394 = vsel %vm1205, %v1141, -inf
  %v2395 = vmax.f32 %v2393, %v2394
  %v2396 = vsel %vm1205, %v78, -inf
  %v2397 = vsel %vm1205, %v211, -inf
  %v2398 = vmax.f32 %v2396, %v2397
  %v2399 = vsel %vm1205, %v344, -inf
  %v2400 = vmax.f32 %v2398, %v2399
  %v2401 = vsel %vm1205, %v477, -inf
  %v2402 = vmax.f32 %v2400, %v2401
  %v2403 = vsel %vm1205, %v610, -inf
  %v2404 = vmax.f32 %v2402, %v2403
  %v2405 = vsel %vm1205, %v743, -inf
  %v2406 = vmax.f32 %v2404, %v2405
  %v2407 = vsel %vm1205, %v876, -inf
  %v2408 = vmax.f32 %v2406, %v2407
  %v2409 = vsel %vm1205, %v1009, -inf
  %v2410 = vmax.f32 %v2408, %v2409
  %v2411 = vsel %vm1205, %v1142, -inf
  %v2412 = vmax.f32 %v2410, %v2411
  %v2413 = vsel %vm1205, %v79, -inf
  %v2414 = vsel %vm1205, %v212, -inf
  %v2415 = vmax.f32 %v2413, %v2414
  %v2416 = vsel %vm1205, %v345, -inf
  %v2417 = vmax.f32 %v2415, %v2416
  %v2418 = vsel %vm1205, %v478, -inf
  %v2419 = vmax.f32 %v2417, %v2418
  %v2420 = vsel %vm1205, %v611, -inf
  %v2421 = vmax.f32 %v2419, %v2420
  %v2422 = vsel %vm1205, %v744, -inf
  %v2423 = vmax.f32 %v2421, %v2422
  %v2424 = vsel %vm1205, %v877, -inf
  %v2425 = vmax.f32 %v2423, %v2424
  %v2426 = vsel %vm1205, %v1010, -inf
  %v2427 = vmax.f32 %v2425, %v2426
  %v2428 = vsel %vm1205, %v1143, -inf
  %v2429 = vmax.f32 %v2427, %v2428
  %v2430 = vsel %vm1205, %v80, -inf
  %v2431 = vsel %vm1205, %v213, -inf
  %v2432 = vmax.f32 %v2430, %v2431
  %v2433 = vsel %vm1205, %v346, -inf
  %v2434 = vmax.f32 %v2432, %v2433
  %v2435 = vsel %vm1205, %v479, -inf
  %v2436 = vmax.f32 %v2434, %v2435
  %v2437 = vsel %vm1205, %v612, -inf
  %v2438 = vmax.f32 %v2436, %v2437
  %v2439 = vsel %vm1205, %v745, -inf
  %v2440 = vmax.f32 %v2438, %v2439
  %v2441 = vsel %vm1205, %v878, -inf
  %v2442 = vmax.f32 %v2440, %v2441
  %v2443 = vsel %vm1205, %v1011, -inf
  %v2444 = vmax.f32 %v2442, %v2443
  %v2445 = vsel %vm1205, %v1144, -inf
  %v2446 = vmax.f32 %v2444, %v2445
  %v2447 = vsel %vm1205, %v81, -inf
  %v2448 = vsel %vm1205, %v214, -inf
  %v2449 = vmax.f32 %v2447, %v2448
  %v2450 = vsel %vm1205, %v347, -inf
  %v2451 = vmax.f32 %v2449, %v2450
  %v2452 = vsel %vm1205, %v480, -inf
  %v2453 = vmax.f32 %v2451, %v2452
  %v2454 = vsel %vm1205, %v613, -inf
  %v2455 = vmax.f32 %v2453, %v2454
  %v2456 = vsel %vm1205, %v746, -inf
  %v2457 = vmax.f32 %v2455, %v2456
  %v2458 = vsel %vm1205, %v879, -inf
  %v2459 = vmax.f32 %v2457, %v2458
  %v2460 = vsel %vm1205, %v1012, -inf
  %v2461 = vmax.f32 %v2459, %v2460
  %v2462 = vsel %vm1205, %v1145, -inf
  %v2463 = vmax.f32 %v2461, %v2462
  %v2464 = vsel %vm1205, %v82, -inf
  %v2465 = vsel %vm1205, %v215, -inf
  %v2466 = vmax.f32 %v2464, %v2465
  %v2467 = vsel %vm1205, %v348, -inf
  %v2468 = vmax.f32 %v2466, %v2467
  %v2469 = vsel %vm1205, %v481, -inf
  %v2470 = vmax.f32 %v2468, %v2469
  %v2471 = vsel %vm1205, %v614, -inf
  %v2472 = vmax.f32 %v2470, %v2471
  %v2473 = vsel %vm1205, %v747, -inf
  %v2474 = vmax.f32 %v2472, %v2473
  %v2475 = vsel %vm1205, %v880, -inf
  %v2476 = vmax.f32 %v2474, %v2475
  %v2477 = vsel %vm1205, %v1013, -inf
  %v2478 = vmax.f32 %v2476, %v2477
  %v2479 = vsel %vm1205, %v1146, -inf
  %v2480 = vmax.f32 %v2478, %v2479
  %v2481 = vsel %vm1205, %v83, -inf
  %v2482 = vsel %vm1205, %v216, -inf
  %v2483 = vmax.f32 %v2481, %v2482
  %v2484 = vsel %vm1205, %v349, -inf
  %v2485 = vmax.f32 %v2483, %v2484
  %v2486 = vsel %vm1205, %v482, -inf
  %v2487 = vmax.f32 %v2485, %v2486
  %v2488 = vsel %vm1205, %v615, -inf
  %v2489 = vmax.f32 %v2487, %v2488
  %v2490 = vsel %vm1205, %v748, -inf
  %v2491 = vmax.f32 %v2489, %v2490
  %v2492 = vsel %vm1205, %v881, -inf
  %v2493 = vmax.f32 %v2491, %v2492
  %v2494 = vsel %vm1205, %v1014, -inf
  %v2495 = vmax.f32 %v2493, %v2494
  %v2496 = vsel %vm1205, %v1147, -inf
  %v2497 = vmax.f32 %v2495, %v2496
  %v2498 = vsel %vm1205, %v84, -inf
  %v2499 = vsel %vm1205, %v217, -inf
  %v2500 = vmax.f32 %v2498, %v2499
  %v2501 = vsel %vm1205, %v350, -inf
  %v2502 = vmax.f32 %v2500, %v2501
  %v2503 = vsel %vm1205, %v483, -inf
  %v2504 = vmax.f32 %v2502, %v2503
  %v2505 = vsel %vm1205, %v616, -inf
  %v2506 = vmax.f32 %v2504, %v2505
  %v2507 = vsel %vm1205, %v749, -inf
  %v2508 = vmax.f32 %v2506, %v2507
  %v2509 = vsel %vm1205, %v882, -inf
  %v2510 = vmax.f32 %v2508, %v2509
  %v2511 = vsel %vm1205, %v1015, -inf
  %v2512 = vmax.f32 %v2510, %v2511
  %v2513 = vsel %vm1205, %v1148, -inf
  %v2514 = vmax.f32 %v2512, %v2513
  %v2515 = vsel %vm1205, %v85, -inf
  %v2516 = vsel %vm1205, %v218, -inf
  %v2517 = vmax.f32 %v2515, %v2516
  %v2518 = vsel %vm1205, %v351, -inf
  %v2519 = vmax.f32 %v2517, %v2518
  %v2520 = vsel %vm1205, %v484, -inf
  %v2521 = vmax.f32 %v2519, %v2520
  %v2522 = vsel %vm1205, %v617, -inf
  %v2523 = vmax.f32 %v2521, %v2522
  %v2524 = vsel %vm1205, %v750, -inf
  %v2525 = vmax.f32 %v2523, %v2524
  %v2526 = vsel %vm1205, %v883, -inf
  %v2527 = vmax.f32 %v2525, %v2526
  %v2528 = vsel %vm1205, %v1016, -inf
  %v2529 = vmax.f32 %v2527, %v2528
  %v2530 = vsel %vm1205, %v1149, -inf
  %v2531 = vmax.f32 %v2529, %v2530
  %v2532 = vsel %vm1205, %v86, -inf
  %v2533 = vsel %vm1205, %v219, -inf
  %v2534 = vmax.f32 %v2532, %v2533
  %v2535 = vsel %vm1205, %v352, -inf
  %v2536 = vmax.f32 %v2534, %v2535
  %v2537 = vsel %vm1205, %v485, -inf
  %v2538 = vmax.f32 %v2536, %v2537
  %v2539 = vsel %vm1205, %v618, -inf
  %v2540 = vmax.f32 %v2538, %v2539
  %v2541 = vsel %vm1205, %v751, -inf
  %v2542 = vmax.f32 %v2540, %v2541
  %v2543 = vsel %vm1205, %v884, -inf
  %v2544 = vmax.f32 %v2542, %v2543
  %v2545 = vsel %vm1205, %v1017, -inf
  %v2546 = vmax.f32 %v2544, %v2545
  %v2547 = vsel %vm1205, %v1150, -inf
  %v2548 = vmax.f32 %v2546, %v2547
  %v2549 = vsel %vm1205, %v87, -inf
  %v2550 = vsel %vm1205, %v220, -inf
  %v2551 = vmax.f32 %v2549, %v2550
  %v2552 = vsel %vm1205, %v353, -inf
  %v2553 = vmax.f32 %v2551, %v2552
  %v2554 = vsel %vm1205, %v486, -inf
  %v2555 = vmax.f32 %v2553, %v2554
  %v2556 = vsel %vm1205, %v619, -inf
  %v2557 = vmax.f32 %v2555, %v2556
  %v2558 = vsel %vm1205, %v752, -inf
  %v2559 = vmax.f32 %v2557, %v2558
  %v2560 = vsel %vm1205, %v885, -inf
  %v2561 = vmax.f32 %v2559, %v2560
  %v2562 = vsel %vm1205, %v1018, -inf
  %v2563 = vmax.f32 %v2561, %v2562
  %v2564 = vsel %vm1205, %v1151, -inf
  %v2565 = vmax.f32 %v2563, %v2564
  %v2566 = vsel %vm1205, %v88, -inf
  %v2567 = vsel %vm1205, %v221, -inf
  %v2568 = vmax.f32 %v2566, %v2567
  %v2569 = vsel %vm1205, %v354, -inf
  %v2570 = vmax.f32 %v2568, %v2569
  %v2571 = vsel %vm1205, %v487, -inf
  %v2572 = vmax.f32 %v2570, %v2571
  %v2573 = vsel %vm1205, %v620, -inf
  %v2574 = vmax.f32 %v2572, %v2573
  %v2575 = vsel %vm1205, %v753, -inf
  %v2576 = vmax.f32 %v2574, %v2575
  %v2577 = vsel %vm1205, %v886, -inf
  %v2578 = vmax.f32 %v2576, %v2577
  %v2579 = vsel %vm1205, %v1019, -inf
  %v2580 = vmax.f32 %v2578, %v2579
  %v2581 = vsel %vm1205, %v1152, -inf
  %v2582 = vmax.f32 %v2580, %v2581
  %v2583 = vsel %vm1205, %v89, -inf
  %v2584 = vsel %vm1205, %v222, -inf
  %v2585 = vmax.f32 %v2583, %v2584
  %v2586 = vsel %vm1205, %v355, -inf
  %v2587 = vmax.f32 %v2585, %v2586
  %v2588 = vsel %vm1205, %v488, -inf
  %v2589 = vmax.f32 %v2587, %v2588
  %v2590 = vsel %vm1205, %v621, -inf
  %v2591 = vmax.f32 %v2589, %v2590
  %v2592 = vsel %vm1205, %v754, -inf
  %v2593 = vmax.f32 %v2591, %v2592
  %v2594 = vsel %vm1205, %v887, -inf
  %v2595 = vmax.f32 %v2593, %v2594
  %v2596 = vsel %vm1205, %v1020, -inf
  %v2597 = vmax.f32 %v2595, %v2596
  %v2598 = vsel %vm1205, %v1153, -inf
  %v2599 = vmax.f32 %v2597, %v2598
  %v2600 = vsel %vm1205, %v90, -inf
  %v2601 = vsel %vm1205, %v223, -inf
  %v2602 = vmax.f32 %v2600, %v2601
  %v2603 = vsel %vm1205, %v356, -inf
  %v2604 = vmax.f32 %v2602, %v2603
  %v2605 = vsel %vm1205, %v489, -inf
  %v2606 = vmax.f32 %v2604, %v2605
  %v2607 = vsel %vm1205, %v622, -inf
  %v2608 = vmax.f32 %v2606, %v2607
  %v2609 = vsel %vm1205, %v755, -inf
  %v2610 = vmax.f32 %v2608, %v2609
  %v2611 = vsel %vm1205, %v888, -inf
  %v2612 = vmax.f32 %v2610, %v2611
  %v2613 = vsel %vm1205, %v1021, -inf
  %v2614 = vmax.f32 %v2612, %v2613
  %v2615 = vsel %vm1205, %v1154, -inf
  %v2616 = vmax.f32 %v2614, %v2615
  %v2617 = vsel %vm1205, %v91, -inf
  %v2618 = vsel %vm1205, %v224, -inf
  %v2619 = vmax.f32 %v2617, %v2618
  %v2620 = vsel %vm1205, %v357, -inf
  %v2621 = vmax.f32 %v2619, %v2620
  %v2622 = vsel %vm1205, %v490, -inf
  %v2623 = vmax.f32 %v2621, %v2622
  %v2624 = vsel %vm1205, %v623, -inf
  %v2625 = vmax.f32 %v2623, %v2624
  %v2626 = vsel %vm1205, %v756, -inf
  %v2627 = vmax.f32 %v2625, %v2626
  %v2628 = vsel %vm1205, %v889, -inf
  %v2629 = vmax.f32 %v2627, %v2628
  %v2630 = vsel %vm1205, %v1022, -inf
  %v2631 = vmax.f32 %v2629, %v2630
  %v2632 = vsel %vm1205, %v1155, -inf
  %v2633 = vmax.f32 %v2631, %v2632
  %v2634 = vsel %vm1205, %v92, -inf
  %v2635 = vsel %vm1205, %v225, -inf
  %v2636 = vmax.f32 %v2634, %v2635
  %v2637 = vsel %vm1205, %v358, -inf
  %v2638 = vmax.f32 %v2636, %v2637
  %v2639 = vsel %vm1205, %v491, -inf
  %v2640 = vmax.f32 %v2638, %v2639
  %v2641 = vsel %vm1205, %v624, -inf
  %v2642 = vmax.f32 %v2640, %v2641
  %v2643 = vsel %vm1205, %v757, -inf
  %v2644 = vmax.f32 %v2642, %v2643
  %v2645 = vsel %vm1205, %v890, -inf
  %v2646 = vmax.f32 %v2644, %v2645
  %v2647 = vsel %vm1205, %v1023, -inf
  %v2648 = vmax.f32 %v2646, %v2647
  %v2649 = vsel %vm1205, %v1156, -inf
  %v2650 = vmax.f32 %v2648, %v2649
  %v2651 = vsel %vm1205, %v93, -inf
  %v2652 = vsel %vm1205, %v226, -inf
  %v2653 = vmax.f32 %v2651, %v2652
  %v2654 = vsel %vm1205, %v359, -inf
  %v2655 = vmax.f32 %v2653, %v2654
  %v2656 = vsel %vm1205, %v492, -inf
  %v2657 = vmax.f32 %v2655, %v2656
  %v2658 = vsel %vm1205, %v625, -inf
  %v2659 = vmax.f32 %v2657, %v2658
  %v2660 = vsel %vm1205, %v758, -inf
  %v2661 = vmax.f32 %v2659, %v2660
  %v2662 = vsel %vm1205, %v891, -inf
  %v2663 = vmax.f32 %v2661, %v2662
  %v2664 = vsel %vm1205, %v1024, -inf
  %v2665 = vmax.f32 %v2663, %v2664
  %v2666 = vsel %vm1205, %v1157, -inf
  %v2667 = vmax.f32 %v2665, %v2666
  %v2668 = vsel %vm1205, %v94, -inf
  %v2669 = vsel %vm1205, %v227, -inf
  %v2670 = vmax.f32 %v2668, %v2669
  %v2671 = vsel %vm1205, %v360, -inf
  %v2672 = vmax.f32 %v2670, %v2671
  %v2673 = vsel %vm1205, %v493, -inf
  %v2674 = vmax.f32 %v2672, %v2673
  %v2675 = vsel %vm1205, %v626, -inf
  %v2676 = vmax.f32 %v2674, %v2675
  %v2677 = vsel %vm1205, %v759, -inf
  %v2678 = vmax.f32 %v2676, %v2677
  %v2679 = vsel %vm1205, %v892, -inf
  %v2680 = vmax.f32 %v2678, %v2679
  %v2681 = vsel %vm1205, %v1025, -inf
  %v2682 = vmax.f32 %v2680, %v2681
  %v2683 = vsel %vm1205, %v1158, -inf
  %v2684 = vmax.f32 %v2682, %v2683
  %v2685 = vsel %vm1205, %v95, -inf
  %v2686 = vsel %vm1205, %v228, -inf
  %v2687 = vmax.f32 %v2685, %v2686
  %v2688 = vsel %vm1205, %v361, -inf
  %v2689 = vmax.f32 %v2687, %v2688
  %v2690 = vsel %vm1205, %v494, -inf
  %v2691 = vmax.f32 %v2689, %v2690
  %v2692 = vsel %vm1205, %v627, -inf
  %v2693 = vmax.f32 %v2691, %v2692
  %v2694 = vsel %vm1205, %v760, -inf
  %v2695 = vmax.f32 %v2693, %v2694
  %v2696 = vsel %vm1205, %v893, -inf
  %v2697 = vmax.f32 %v2695, %v2696
  %v2698 = vsel %vm1205, %v1026, -inf
  %v2699 = vmax.f32 %v2697, %v2698
  %v2700 = vsel %vm1205, %v1159, -inf
  %v2701 = vmax.f32 %v2699, %v2700
  %v2702 = vsel %vm1205, %v96, -inf
  %v2703 = vsel %vm1205, %v229, -inf
  %v2704 = vmax.f32 %v2702, %v2703
  %v2705 = vsel %vm1205, %v362, -inf
  %v2706 = vmax.f32 %v2704, %v2705
  %v2707 = vsel %vm1205, %v495, -inf
  %v2708 = vmax.f32 %v2706, %v2707
  %v2709 = vsel %vm1205, %v628, -inf
  %v2710 = vmax.f32 %v2708, %v2709
  %v2711 = vsel %vm1205, %v761, -inf
  %v2712 = vmax.f32 %v2710, %v2711
  %v2713 = vsel %vm1205, %v894, -inf
  %v2714 = vmax.f32 %v2712, %v2713
  %v2715 = vsel %vm1205, %v1027, -inf
  %v2716 = vmax.f32 %v2714, %v2715
  %v2717 = vsel %vm1205, %v1160, -inf
  %v2718 = vmax.f32 %v2716, %v2717
  %v2719 = vsel %vm1205, %v97, -inf
  %v2720 = vsel %vm1205, %v230, -inf
  %v2721 = vmax.f32 %v2719, %v2720
  %v2722 = vsel %vm1205, %v363, -inf
  %v2723 = vmax.f32 %v2721, %v2722
  %v2724 = vsel %vm1205, %v496, -inf
  %v2725 = vmax.f32 %v2723, %v2724
  %v2726 = vsel %vm1205, %v629, -inf
  %v2727 = vmax.f32 %v2725, %v2726
  %v2728 = vsel %vm1205, %v762, -inf
  %v2729 = vmax.f32 %v2727, %v2728
  %v2730 = vsel %vm1205, %v895, -inf
  %v2731 = vmax.f32 %v2729, %v2730
  %v2732 = vsel %vm1205, %v1028, -inf
  %v2733 = vmax.f32 %v2731, %v2732
  %v2734 = vsel %vm1205, %v1161, -inf
  %v2735 = vmax.f32 %v2733, %v2734
  %v2736 = vsel %vm1205, %v98, -inf
  %v2737 = vsel %vm1205, %v231, -inf
  %v2738 = vmax.f32 %v2736, %v2737
  %v2739 = vsel %vm1205, %v364, -inf
  %v2740 = vmax.f32 %v2738, %v2739
  %v2741 = vsel %vm1205, %v497, -inf
  %v2742 = vmax.f32 %v2740, %v2741
  %v2743 = vsel %vm1205, %v630, -inf
  %v2744 = vmax.f32 %v2742, %v2743
  %v2745 = vsel %vm1205, %v763, -inf
  %v2746 = vmax.f32 %v2744, %v2745
  %v2747 = vsel %vm1205, %v896, -inf
  %v2748 = vmax.f32 %v2746, %v2747
  %v2749 = vsel %vm1205, %v1029, -inf
  %v2750 = vmax.f32 %v2748, %v2749
  %v2751 = vsel %vm1205, %v1162, -inf
  %v2752 = vmax.f32 %v2750, %v2751
  %v2753 = vsel %vm1205, %v99, -inf
  %v2754 = vsel %vm1205, %v232, -inf
  %v2755 = vmax.f32 %v2753, %v2754
  %v2756 = vsel %vm1205, %v365, -inf
  %v2757 = vmax.f32 %v2755, %v2756
  %v2758 = vsel %vm1205, %v498, -inf
  %v2759 = vmax.f32 %v2757, %v2758
  %v2760 = vsel %vm1205, %v631, -inf
  %v2761 = vmax.f32 %v2759, %v2760
  %v2762 = vsel %vm1205, %v764, -inf
  %v2763 = vmax.f32 %v2761, %v2762
  %v2764 = vsel %vm1205, %v897, -inf
  %v2765 = vmax.f32 %v2763, %v2764
  %v2766 = vsel %vm1205, %v1030, -inf
  %v2767 = vmax.f32 %v2765, %v2766
  %v2768 = vsel %vm1205, %v1163, -inf
  %v2769 = vmax.f32 %v2767, %v2768
  %v2770 = vsel %vm1205, %v100, -inf
  %v2771 = vsel %vm1205, %v233, -inf
  %v2772 = vmax.f32 %v2770, %v2771
  %v2773 = vsel %vm1205, %v366, -inf
  %v2774 = vmax.f32 %v2772, %v2773
  %v2775 = vsel %vm1205, %v499, -inf
  %v2776 = vmax.f32 %v2774, %v2775
  %v2777 = vsel %vm1205, %v632, -inf
  %v2778 = vmax.f32 %v2776, %v2777
  %v2779 = vsel %vm1205, %v765, -inf
  %v2780 = vmax.f32 %v2778, %v2779
  %v2781 = vsel %vm1205, %v898, -inf
  %v2782 = vmax.f32 %v2780, %v2781
  %v2783 = vsel %vm1205, %v1031, -inf
  %v2784 = vmax.f32 %v2782, %v2783
  %v2785 = vsel %vm1205, %v1164, -inf
  %v2786 = vmax.f32 %v2784, %v2785
  %v2787 = vsel %vm1205, %v101, -inf
  %v2788 = vsel %vm1205, %v234, -inf
  %v2789 = vmax.f32 %v2787, %v2788
  %v2790 = vsel %vm1205, %v367, -inf
  %v2791 = vmax.f32 %v2789, %v2790
  %v2792 = vsel %vm1205, %v500, -inf
  %v2793 = vmax.f32 %v2791, %v2792
  %v2794 = vsel %vm1205, %v633, -inf
  %v2795 = vmax.f32 %v2793, %v2794
  %v2796 = vsel %vm1205, %v766, -inf
  %v2797 = vmax.f32 %v2795, %v2796
  %v2798 = vsel %vm1205, %v899, -inf
  %v2799 = vmax.f32 %v2797, %v2798
  %v2800 = vsel %vm1205, %v1032, -inf
  %v2801 = vmax.f32 %v2799, %v2800
  %v2802 = vsel %vm1205, %v1165, -inf
  %v2803 = vmax.f32 %v2801, %v2802
  %v2804 = vsel %vm1205, %v102, -inf
  %v2805 = vsel %vm1205, %v235, -inf
  %v2806 = vmax.f32 %v2804, %v2805
  %v2807 = vsel %vm1205, %v368, -inf
  %v2808 = vmax.f32 %v2806, %v2807
  %v2809 = vsel %vm1205, %v501, -inf
  %v2810 = vmax.f32 %v2808, %v2809
  %v2811 = vsel %vm1205, %v634, -inf
  %v2812 = vmax.f32 %v2810, %v2811
  %v2813 = vsel %vm1205, %v767, -inf
  %v2814 = vmax.f32 %v2812, %v2813
  %v2815 = vsel %vm1205, %v900, -inf
  %v2816 = vmax.f32 %v2814, %v2815
  %v2817 = vsel %vm1205, %v1033, -inf
  %v2818 = vmax.f32 %v2816, %v2817
  %v2819 = vsel %vm1205, %v1166, -inf
  %v2820 = vmax.f32 %v2818, %v2819
  %v2821 = vsel %vm1205, %v103, -inf
  %v2822 = vsel %vm1205, %v236, -inf
  %v2823 = vmax.f32 %v2821, %v2822
  %v2824 = vsel %vm1205, %v369, -inf
  %v2825 = vmax.f32 %v2823, %v2824
  %v2826 = vsel %vm1205, %v502, -inf
  %v2827 = vmax.f32 %v2825, %v2826
  %v2828 = vsel %vm1205, %v635, -inf
  %v2829 = vmax.f32 %v2827, %v2828
  %v2830 = vsel %vm1205, %v768, -inf
  %v2831 = vmax.f32 %v2829, %v2830
  %v2832 = vsel %vm1205, %v901, -inf
  %v2833 = vmax.f32 %v2831, %v2832
  %v2834 = vsel %vm1205, %v1034, -inf
  %v2835 = vmax.f32 %v2833, %v2834
  %v2836 = vsel %vm1205, %v1167, -inf
  %v2837 = vmax.f32 %v2835, %v2836
  %v2838 = vsel %vm1205, %v104, -inf
  %v2839 = vsel %vm1205, %v237, -inf
  %v2840 = vmax.f32 %v2838, %v2839
  %v2841 = vsel %vm1205, %v370, -inf
  %v2842 = vmax.f32 %v2840, %v2841
  %v2843 = vsel %vm1205, %v503, -inf
  %v2844 = vmax.f32 %v2842, %v2843
  %v2845 = vsel %vm1205, %v636, -inf
  %v2846 = vmax.f32 %v2844, %v2845
  %v2847 = vsel %vm1205, %v769, -inf
  %v2848 = vmax.f32 %v2846, %v2847
  %v2849 = vsel %vm1205, %v902, -inf
  %v2850 = vmax.f32 %v2848, %v2849
  %v2851 = vsel %vm1205, %v1035, -inf
  %v2852 = vmax.f32 %v2850, %v2851
  %v2853 = vsel %vm1205, %v1168, -inf
  %v2854 = vmax.f32 %v2852, %v2853
  %v2855 = vsel %vm1205, %v105, -inf
  %v2856 = vsel %vm1205, %v238, -inf
  %v2857 = vmax.f32 %v2855, %v2856
  %v2858 = vsel %vm1205, %v371, -inf
  %v2859 = vmax.f32 %v2857, %v2858
  %v2860 = vsel %vm1205, %v504, -inf
  %v2861 = vmax.f32 %v2859, %v2860
  %v2862 = vsel %vm1205, %v637, -inf
  %v2863 = vmax.f32 %v2861, %v2862
  %v2864 = vsel %vm1205, %v770, -inf
  %v2865 = vmax.f32 %v2863, %v2864
  %v2866 = vsel %vm1205, %v903, -inf
  %v2867 = vmax.f32 %v2865, %v2866
  %v2868 = vsel %vm1205, %v1036, -inf
  %v2869 = vmax.f32 %v2867, %v2868
  %v2870 = vsel %vm1205, %v1169, -inf
  %v2871 = vmax.f32 %v2869, %v2870
  %v2872 = vsel %vm1205, %v106, -inf
  %v2873 = vsel %vm1205, %v239, -inf
  %v2874 = vmax.f32 %v2872, %v2873
  %v2875 = vsel %vm1205, %v372, -inf
  %v2876 = vmax.f32 %v2874, %v2875
  %v2877 = vsel %vm1205, %v505, -inf
  %v2878 = vmax.f32 %v2876, %v2877
  %v2879 = vsel %vm1205, %v638, -inf
  %v2880 = vmax.f32 %v2878, %v2879
  %v2881 = vsel %vm1205, %v771, -inf
  %v2882 = vmax.f32 %v2880, %v2881
  %v2883 = vsel %vm1205, %v904, -inf
  %v2884 = vmax.f32 %v2882, %v2883
  %v2885 = vsel %vm1205, %v1037, -inf
  %v2886 = vmax.f32 %v2884, %v2885
  %v2887 = vsel %vm1205, %v1170, -inf
  %v2888 = vmax.f32 %v2886, %v2887
  %v2889 = vsel %vm1205, %v107, -inf
  %v2890 = vsel %vm1205, %v240, -inf
  %v2891 = vmax.f32 %v2889, %v2890
  %v2892 = vsel %vm1205, %v373, -inf
  %v2893 = vmax.f32 %v2891, %v2892
  %v2894 = vsel %vm1205, %v506, -inf
  %v2895 = vmax.f32 %v2893, %v2894
  %v2896 = vsel %vm1205, %v639, -inf
  %v2897 = vmax.f32 %v2895, %v2896
  %v2898 = vsel %vm1205, %v772, -inf
  %v2899 = vmax.f32 %v2897, %v2898
  %v2900 = vsel %vm1205, %v905, -inf
  %v2901 = vmax.f32 %v2899, %v2900
  %v2902 = vsel %vm1205, %v1038, -inf
  %v2903 = vmax.f32 %v2901, %v2902
  %v2904 = vsel %vm1205, %v1171, -inf
  %v2905 = vmax.f32 %v2903, %v2904
  %v2906 = vsel %vm1205, %v108, -inf
  %v2907 = vsel %vm1205, %v241, -inf
  %v2908 = vmax.f32 %v2906, %v2907
  %v2909 = vsel %vm1205, %v374, -inf
  %v2910 = vmax.f32 %v2908, %v2909
  %v2911 = vsel %vm1205, %v507, -inf
  %v2912 = vmax.f32 %v2910, %v2911
  %v2913 = vsel %vm1205, %v640, -inf
  %v2914 = vmax.f32 %v2912, %v2913
  %v2915 = vsel %vm1205, %v773, -inf
  %v2916 = vmax.f32 %v2914, %v2915
  %v2917 = vsel %vm1205, %v906, -inf
  %v2918 = vmax.f32 %v2916, %v2917
  %v2919 = vsel %vm1205, %v1039, -inf
  %v2920 = vmax.f32 %v2918, %v2919
  %v2921 = vsel %vm1205, %v1172, -inf
  %v2922 = vmax.f32 %v2920, %v2921
  %v2923 = vsel %vm1205, %v109, -inf
  %v2924 = vsel %vm1205, %v242, -inf
  %v2925 = vmax.f32 %v2923, %v2924
  %v2926 = vsel %vm1205, %v375, -inf
  %v2927 = vmax.f32 %v2925, %v2926
  %v2928 = vsel %vm1205, %v508, -inf
  %v2929 = vmax.f32 %v2927, %v2928
  %v2930 = vsel %vm1205, %v641, -inf
  %v2931 = vmax.f32 %v2929, %v2930
  %v2932 = vsel %vm1205, %v774, -inf
  %v2933 = vmax.f32 %v2931, %v2932
  %v2934 = vsel %vm1205, %v907, -inf
  %v2935 = vmax.f32 %v2933, %v2934
  %v2936 = vsel %vm1205, %v1040, -inf
  %v2937 = vmax.f32 %v2935, %v2936
  %v2938 = vsel %vm1205, %v1173, -inf
  %v2939 = vmax.f32 %v2937, %v2938
  %v2940 = vsel %vm1205, %v110, -inf
  %v2941 = vsel %vm1205, %v243, -inf
  %v2942 = vmax.f32 %v2940, %v2941
  %v2943 = vsel %vm1205, %v376, -inf
  %v2944 = vmax.f32 %v2942, %v2943
  %v2945 = vsel %vm1205, %v509, -inf
  %v2946 = vmax.f32 %v2944, %v2945
  %v2947 = vsel %vm1205, %v642, -inf
  %v2948 = vmax.f32 %v2946, %v2947
  %v2949 = vsel %vm1205, %v775, -inf
  %v2950 = vmax.f32 %v2948, %v2949
  %v2951 = vsel %vm1205, %v908, -inf
  %v2952 = vmax.f32 %v2950, %v2951
  %v2953 = vsel %vm1205, %v1041, -inf
  %v2954 = vmax.f32 %v2952, %v2953
  %v2955 = vsel %vm1205, %v1174, -inf
  %v2956 = vmax.f32 %v2954, %v2955
  %v2957 = vsel %vm1205, %v111, -inf
  %v2958 = vsel %vm1205, %v244, -inf
  %v2959 = vmax.f32 %v2957, %v2958
  %v2960 = vsel %vm1205, %v377, -inf
  %v2961 = vmax.f32 %v2959, %v2960
  %v2962 = vsel %vm1205, %v510, -inf
  %v2963 = vmax.f32 %v2961, %v2962
  %v2964 = vsel %vm1205, %v643, -inf
  %v2965 = vmax.f32 %v2963, %v2964
  %v2966 = vsel %vm1205, %v776, -inf
  %v2967 = vmax.f32 %v2965, %v2966
  %v2968 = vsel %vm1205, %v909, -inf
  %v2969 = vmax.f32 %v2967, %v2968
  %v2970 = vsel %vm1205, %v1042, -inf
  %v2971 = vmax.f32 %v2969, %v2970
  %v2972 = vsel %vm1205, %v1175, -inf
  %v2973 = vmax.f32 %v2971, %v2972
  %v2974 = vsel %vm1205, %v112, -inf
  %v2975 = vsel %vm1205, %v245, -inf
  %v2976 = vmax.f32 %v2974, %v2975
  %v2977 = vsel %vm1205, %v378, -inf
  %v2978 = vmax.f32 %v2976, %v2977
  %v2979 = vsel %vm1205, %v511, -inf
  %v2980 = vmax.f32 %v2978, %v2979
  %v2981 = vsel %vm1205, %v644, -inf
  %v2982 = vmax.f32 %v2980, %v2981
  %v2983 = vsel %vm1205, %v777, -inf
  %v2984 = vmax.f32 %v2982, %v2983
  %v2985 = vsel %vm1205, %v910, -inf
  %v2986 = vmax.f32 %v2984, %v2985
  %v2987 = vsel %vm1205, %v1043, -inf
  %v2988 = vmax.f32 %v2986, %v2987
  %v2989 = vsel %vm1205, %v1176, -inf
  %v2990 = vmax.f32 %v2988, %v2989
  %v2991 = vsel %vm1205, %v113, -inf
  %v2992 = vsel %vm1205, %v246, -inf
  %v2993 = vmax.f32 %v2991, %v2992
  %v2994 = vsel %vm1205, %v379, -inf
  %v2995 = vmax.f32 %v2993, %v2994
  %v2996 = vsel %vm1205, %v512, -inf
  %v2997 = vmax.f32 %v2995, %v2996
  %v2998 = vsel %vm1205, %v645, -inf
  %v2999 = vmax.f32 %v2997, %v2998
  %v3000 = vsel %vm1205, %v778, -inf
  %v3001 = vmax.f32 %v2999, %v3000
  %v3002 = vsel %vm1205, %v911, -inf
  %v3003 = vmax.f32 %v3001, %v3002
  %v3004 = vsel %vm1205, %v1044, -inf
  %v3005 = vmax.f32 %v3003, %v3004
  %v3006 = vsel %vm1205, %v1177, -inf
  %v3007 = vmax.f32 %v3005, %v3006
  %v3008 = vsel %vm1205, %v114, -inf
  %v3009 = vsel %vm1205, %v247, -inf
  %v3010 = vmax.f32 %v3008, %v3009
  %v3011 = vsel %vm1205, %v380, -inf
  %v3012 = vmax.f32 %v3010, %v3011
  %v3013 = vsel %vm1205, %v513, -inf
  %v3014 = vmax.f32 %v3012, %v3013
  %v3015 = vsel %vm1205, %v646, -inf
  %v3016 = vmax.f32 %v3014, %v3015
  %v3017 = vsel %vm1205, %v779, -inf
  %v3018 = vmax.f32 %v3016, %v3017
  %v3019 = vsel %vm1205, %v912, -inf
  %v3020 = vmax.f32 %v3018, %v3019
  %v3021 = vsel %vm1205, %v1045, -inf
  %v3022 = vmax.f32 %v3020, %v3021
  %v3023 = vsel %vm1205, %v1178, -inf
  %v3024 = vmax.f32 %v3022, %v3023
  %v3025 = vsel %vm1205, %v115, -inf
  %v3026 = vsel %vm1205, %v248, -inf
  %v3027 = vmax.f32 %v3025, %v3026
  %v3028 = vsel %vm1205, %v381, -inf
  %v3029 = vmax.f32 %v3027, %v3028
  %v3030 = vsel %vm1205, %v514, -inf
  %v3031 = vmax.f32 %v3029, %v3030
  %v3032 = vsel %vm1205, %v647, -inf
  %v3033 = vmax.f32 %v3031, %v3032
  %v3034 = vsel %vm1205, %v780, -inf
  %v3035 = vmax.f32 %v3033, %v3034
  %v3036 = vsel %vm1205, %v913, -inf
  %v3037 = vmax.f32 %v3035, %v3036
  %v3038 = vsel %vm1205, %v1046, -inf
  %v3039 = vmax.f32 %v3037, %v3038
  %v3040 = vsel %vm1205, %v1179, -inf
  %v3041 = vmax.f32 %v3039, %v3040
  %v3042 = vsel %vm1205, %v116, -inf
  %v3043 = vsel %vm1205, %v249, -inf
  %v3044 = vmax.f32 %v3042, %v3043
  %v3045 = vsel %vm1205, %v382, -inf
  %v3046 = vmax.f32 %v3044, %v3045
  %v3047 = vsel %vm1205, %v515, -inf
  %v3048 = vmax.f32 %v3046, %v3047
  %v3049 = vsel %vm1205, %v648, -inf
  %v3050 = vmax.f32 %v3048, %v3049
  %v3051 = vsel %vm1205, %v781, -inf
  %v3052 = vmax.f32 %v3050, %v3051
  %v3053 = vsel %vm1205, %v914, -inf
  %v3054 = vmax.f32 %v3052, %v3053
  %v3055 = vsel %vm1205, %v1047, -inf
  %v3056 = vmax.f32 %v3054, %v3055
  %v3057 = vsel %vm1205, %v1180, -inf
  %v3058 = vmax.f32 %v3056, %v3057
  %v3059 = vsel %vm1205, %v117, -inf
  %v3060 = vsel %vm1205, %v250, -inf
  %v3061 = vmax.f32 %v3059, %v3060
  %v3062 = vsel %vm1205, %v383, -inf
  %v3063 = vmax.f32 %v3061, %v3062
  %v3064 = vsel %vm1205, %v516, -inf
  %v3065 = vmax.f32 %v3063, %v3064
  %v3066 = vsel %vm1205, %v649, -inf
  %v3067 = vmax.f32 %v3065, %v3066
  %v3068 = vsel %vm1205, %v782, -inf
  %v3069 = vmax.f32 %v3067, %v3068
  %v3070 = vsel %vm1205, %v915, -inf
  %v3071 = vmax.f32 %v3069, %v3070
  %v3072 = vsel %vm1205, %v1048, -inf
  %v3073 = vmax.f32 %v3071, %v3072
  %v3074 = vsel %vm1205, %v1181, -inf
  %v3075 = vmax.f32 %v3073, %v3074
  %v3076 = vsel %vm1205, %v118, -inf
  %v3077 = vsel %vm1205, %v251, -inf
  %v3078 = vmax.f32 %v3076, %v3077
  %v3079 = vsel %vm1205, %v384, -inf
  %v3080 = vmax.f32 %v3078, %v3079
  %v3081 = vsel %vm1205, %v517, -inf
  %v3082 = vmax.f32 %v3080, %v3081
  %v3083 = vsel %vm1205, %v650, -inf
  %v3084 = vmax.f32 %v3082, %v3083
  %v3085 = vsel %vm1205, %v783, -inf
  %v3086 = vmax.f32 %v3084, %v3085
  %v3087 = vsel %vm1205, %v916, -inf
  %v3088 = vmax.f32 %v3086, %v3087
  %v3089 = vsel %vm1205, %v1049, -inf
  %v3090 = vmax.f32 %v3088, %v3089
  %v3091 = vsel %vm1205, %v1182, -inf
  %v3092 = vmax.f32 %v3090, %v3091
  %v3093 = vsel %vm1205, %v119, -inf
  %v3094 = vsel %vm1205, %v252, -inf
  %v3095 = vmax.f32 %v3093, %v3094
  %v3096 = vsel %vm1205, %v385, -inf
  %v3097 = vmax.f32 %v3095, %v3096
  %v3098 = vsel %vm1205, %v518, -inf
  %v3099 = vmax.f32 %v3097, %v3098
  %v3100 = vsel %vm1205, %v651, -inf
  %v3101 = vmax.f32 %v3099, %v3100
  %v3102 = vsel %vm1205, %v784, -inf
  %v3103 = vmax.f32 %v3101, %v3102
  %v3104 = vsel %vm1205, %v917, -inf
  %v3105 = vmax.f32 %v3103, %v3104
  %v3106 = vsel %vm1205, %v1050, -inf
  %v3107 = vmax.f32 %v3105, %v3106
  %v3108 = vsel %vm1205, %v1183, -inf
  %v3109 = vmax.f32 %v3107, %v3108
  %v3110 = vsel %vm1205, %v120, -inf
  %v3111 = vsel %vm1205, %v253, -inf
  %v3112 = vmax.f32 %v3110, %v3111
  %v3113 = vsel %vm1205, %v386, -inf
  %v3114 = vmax.f32 %v3112, %v3113
  %v3115 = vsel %vm1205, %v519, -inf
  %v3116 = vmax.f32 %v3114, %v3115
  %v3117 = vsel %vm1205, %v652, -inf
  %v3118 = vmax.f32 %v3116, %v3117
  %v3119 = vsel %vm1205, %v785, -inf
  %v3120 = vmax.f32 %v3118, %v3119
  %v3121 = vsel %vm1205, %v918, -inf
  %v3122 = vmax.f32 %v3120, %v3121
  %v3123 = vsel %vm1205, %v1051, -inf
  %v3124 = vmax.f32 %v3122, %v3123
  %v3125 = vsel %vm1205, %v1184, -inf
  %v3126 = vmax.f32 %v3124, %v3125
  %v3127 = vsel %vm1205, %v121, -inf
  %v3128 = vsel %vm1205, %v254, -inf
  %v3129 = vmax.f32 %v3127, %v3128
  %v3130 = vsel %vm1205, %v387, -inf
  %v3131 = vmax.f32 %v3129, %v3130
  %v3132 = vsel %vm1205, %v520, -inf
  %v3133 = vmax.f32 %v3131, %v3132
  %v3134 = vsel %vm1205, %v653, -inf
  %v3135 = vmax.f32 %v3133, %v3134
  %v3136 = vsel %vm1205, %v786, -inf
  %v3137 = vmax.f32 %v3135, %v3136
  %v3138 = vsel %vm1205, %v919, -inf
  %v3139 = vmax.f32 %v3137, %v3138
  %v3140 = vsel %vm1205, %v1052, -inf
  %v3141 = vmax.f32 %v3139, %v3140
  %v3142 = vsel %vm1205, %v1185, -inf
  %v3143 = vmax.f32 %v3141, %v3142
  %v3144 = vsel %vm1205, %v122, -inf
  %v3145 = vsel %vm1205, %v255, -inf
  %v3146 = vmax.f32 %v3144, %v3145
  %v3147 = vsel %vm1205, %v388, -inf
  %v3148 = vmax.f32 %v3146, %v3147
  %v3149 = vsel %vm1205, %v521, -inf
  %v3150 = vmax.f32 %v3148, %v3149
  %v3151 = vsel %vm1205, %v654, -inf
  %v3152 = vmax.f32 %v3150, %v3151
  %v3153 = vsel %vm1205, %v787, -inf
  %v3154 = vmax.f32 %v3152, %v3153
  %v3155 = vsel %vm1205, %v920, -inf
  %v3156 = vmax.f32 %v3154, %v3155
  %v3157 = vsel %vm1205, %v1053, -inf
  %v3158 = vmax.f32 %v3156, %v3157
  %v3159 = vsel %vm1205, %v1186, -inf
  %v3160 = vmax.f32 %v3158, %v3159
  %v3161 = vsel %vm1205, %v123, -inf
  %v3162 = vsel %vm1205, %v256, -inf
  %v3163 = vmax.f32 %v3161, %v3162
  %v3164 = vsel %vm1205, %v389, -inf
  %v3165 = vmax.f32 %v3163, %v3164
  %v3166 = vsel %vm1205, %v522, -inf
  %v3167 = vmax.f32 %v3165, %v3166
  %v3168 = vsel %vm1205, %v655, -inf
  %v3169 = vmax.f32 %v3167, %v3168
  %v3170 = vsel %vm1205, %v788, -inf
  %v3171 = vmax.f32 %v3169, %v3170
  %v3172 = vsel %vm1205, %v921, -inf
  %v3173 = vmax.f32 %v3171, %v3172
  %v3174 = vsel %vm1205, %v1054, -inf
  %v3175 = vmax.f32 %v3173, %v3174
  %v3176 = vsel %vm1205, %v1187, -inf
  %v3177 = vmax.f32 %v3175, %v3176
  %v3178 = vsel %vm1205, %v124, -inf
  %v3179 = vsel %vm1205, %v257, -inf
  %v3180 = vmax.f32 %v3178, %v3179
  %v3181 = vsel %vm1205, %v390, -inf
  %v3182 = vmax.f32 %v3180, %v3181
  %v3183 = vsel %vm1205, %v523, -inf
  %v3184 = vmax.f32 %v3182, %v3183
  %v3185 = vsel %vm1205, %v656, -inf
  %v3186 = vmax.f32 %v3184, %v3185
  %v3187 = vsel %vm1205, %v789, -inf
  %v3188 = vmax.f32 %v3186, %v3187
  %v3189 = vsel %vm1205, %v922, -inf
  %v3190 = vmax.f32 %v3188, %v3189
  %v3191 = vsel %vm1205, %v1055, -inf
  %v3192 = vmax.f32 %v3190, %v3191
  %v3193 = vsel %vm1205, %v1188, -inf
  %v3194 = vmax.f32 %v3192, %v3193
  %v3195 = vsel %vm1205, %v125, -inf
  %v3196 = vsel %vm1205, %v258, -inf
  %v3197 = vmax.f32 %v3195, %v3196
  %v3198 = vsel %vm1205, %v391, -inf
  %v3199 = vmax.f32 %v3197, %v3198
  %v3200 = vsel %vm1205, %v524, -inf
  %v3201 = vmax.f32 %v3199, %v3200
  %v3202 = vsel %vm1205, %v657, -inf
  %v3203 = vmax.f32 %v3201, %v3202
  %v3204 = vsel %vm1205, %v790, -inf
  %v3205 = vmax.f32 %v3203, %v3204
  %v3206 = vsel %vm1205, %v923, -inf
  %v3207 = vmax.f32 %v3205, %v3206
  %v3208 = vsel %vm1205, %v1056, -inf
  %v3209 = vmax.f32 %v3207, %v3208
  %v3210 = vsel %vm1205, %v1189, -inf
  %v3211 = vmax.f32 %v3209, %v3210
  %v3212 = vsel %vm1205, %v126, -inf
  %v3213 = vsel %vm1205, %v259, -inf
  %v3214 = vmax.f32 %v3212, %v3213
  %v3215 = vsel %vm1205, %v392, -inf
  %v3216 = vmax.f32 %v3214, %v3215
  %v3217 = vsel %vm1205, %v525, -inf
  %v3218 = vmax.f32 %v3216, %v3217
  %v3219 = vsel %vm1205, %v658, -inf
  %v3220 = vmax.f32 %v3218, %v3219
  %v3221 = vsel %vm1205, %v791, -inf
  %v3222 = vmax.f32 %v3220, %v3221
  %v3223 = vsel %vm1205, %v924, -inf
  %v3224 = vmax.f32 %v3222, %v3223
  %v3225 = vsel %vm1205, %v1057, -inf
  %v3226 = vmax.f32 %v3224, %v3225
  %v3227 = vsel %vm1205, %v1190, -inf
  %v3228 = vmax.f32 %v3226, %v3227
  %v3229 = vsel %vm1205, %v127, -inf
  %v3230 = vsel %vm1205, %v260, -inf
  %v3231 = vmax.f32 %v3229, %v3230
  %v3232 = vsel %vm1205, %v393, -inf
  %v3233 = vmax.f32 %v3231, %v3232
  %v3234 = vsel %vm1205, %v526, -inf
  %v3235 = vmax.f32 %v3233, %v3234
  %v3236 = vsel %vm1205, %v659, -inf
  %v3237 = vmax.f32 %v3235, %v3236
  %v3238 = vsel %vm1205, %v792, -inf
  %v3239 = vmax.f32 %v3237, %v3238
  %v3240 = vsel %vm1205, %v925, -inf
  %v3241 = vmax.f32 %v3239, %v3240
  %v3242 = vsel %vm1205, %v1058, -inf
  %v3243 = vmax.f32 %v3241, %v3242
  %v3244 = vsel %vm1205, %v1191, -inf
  %v3245 = vmax.f32 %v3243, %v3244
  %v3246 = vsel %vm1205, %v128, -inf
  %v3247 = vsel %vm1205, %v261, -inf
  %v3248 = vmax.f32 %v3246, %v3247
  %v3249 = vsel %vm1205, %v394, -inf
  %v3250 = vmax.f32 %v3248, %v3249
  %v3251 = vsel %vm1205, %v527, -inf
  %v3252 = vmax.f32 %v3250, %v3251
  %v3253 = vsel %vm1205, %v660, -inf
  %v3254 = vmax.f32 %v3252, %v3253
  %v3255 = vsel %vm1205, %v793, -inf
  %v3256 = vmax.f32 %v3254, %v3255
  %v3257 = vsel %vm1205, %v926, -inf
  %v3258 = vmax.f32 %v3256, %v3257
  %v3259 = vsel %vm1205, %v1059, -inf
  %v3260 = vmax.f32 %v3258, %v3259
  %v3261 = vsel %vm1205, %v1192, -inf
  %v3262 = vmax.f32 %v3260, %v3261
  %v3263 = vsel %vm1205, %v129, -inf
  %v3264 = vsel %vm1205, %v262, -inf
  %v3265 = vmax.f32 %v3263, %v3264
  %v3266 = vsel %vm1205, %v395, -inf
  %v3267 = vmax.f32 %v3265, %v3266
  %v3268 = vsel %vm1205, %v528, -inf
  %v3269 = vmax.f32 %v3267, %v3268
  %v3270 = vsel %vm1205, %v661, -inf
  %v3271 = vmax.f32 %v3269, %v3270
  %v3272 = vsel %vm1205, %v794, -inf
  %v3273 = vmax.f32 %v3271, %v3272
  %v3274 = vsel %vm1205, %v927, -inf
  %v3275 = vmax.f32 %v3273, %v3274
  %v3276 = vsel %vm1205, %v1060, -inf
  %v3277 = vmax.f32 %v3275, %v3276
  %v3278 = vsel %vm1205, %v1193, -inf
  %v3279 = vmax.f32 %v3277, %v3278
  %v3280 = vsel %vm1205, %v130, -inf
  %v3281 = vsel %vm1205, %v263, -inf
  %v3282 = vmax.f32 %v3280, %v3281
  %v3283 = vsel %vm1205, %v396, -inf
  %v3284 = vmax.f32 %v3282, %v3283
  %v3285 = vsel %vm1205, %v529, -inf
  %v3286 = vmax.f32 %v3284, %v3285
  %v3287 = vsel %vm1205, %v662, -inf
  %v3288 = vmax.f32 %v3286, %v3287
  %v3289 = vsel %vm1205, %v795, -inf
  %v3290 = vmax.f32 %v3288, %v3289
  %v3291 = vsel %vm1205, %v928, -inf
  %v3292 = vmax.f32 %v3290, %v3291
  %v3293 = vsel %vm1205, %v1061, -inf
  %v3294 = vmax.f32 %v3292, %v3293
  %v3295 = vsel %vm1205, %v1194, -inf
  %v3296 = vmax.f32 %v3294, %v3295
  %v3297 = vsel %vm1205, %v131, -inf
  %v3298 = vsel %vm1205, %v264, -inf
  %v3299 = vmax.f32 %v3297, %v3298
  %v3300 = vsel %vm1205, %v397, -inf
  %v3301 = vmax.f32 %v3299, %v3300
  %v3302 = vsel %vm1205, %v530, -inf
  %v3303 = vmax.f32 %v3301, %v3302
  %v3304 = vsel %vm1205, %v663, -inf
  %v3305 = vmax.f32 %v3303, %v3304
  %v3306 = vsel %vm1205, %v796, -inf
  %v3307 = vmax.f32 %v3305, %v3306
  %v3308 = vsel %vm1205, %v929, -inf
  %v3309 = vmax.f32 %v3307, %v3308
  %v3310 = vsel %vm1205, %v1062, -inf
  %v3311 = vmax.f32 %v3309, %v3310
  %v3312 = vsel %vm1205, %v1195, -inf
  %v3313 = vmax.f32 %v3311, %v3312
  %v3314 = vsel %vm1205, %v132, -inf
  %v3315 = vsel %vm1205, %v265, -inf
  %v3316 = vmax.f32 %v3314, %v3315
  %v3317 = vsel %vm1205, %v398, -inf
  %v3318 = vmax.f32 %v3316, %v3317
  %v3319 = vsel %vm1205, %v531, -inf
  %v3320 = vmax.f32 %v3318, %v3319
  %v3321 = vsel %vm1205, %v664, -inf
  %v3322 = vmax.f32 %v3320, %v3321
  %v3323 = vsel %vm1205, %v797, -inf
  %v3324 = vmax.f32 %v3322, %v3323
  %v3325 = vsel %vm1205, %v930, -inf
  %v3326 = vmax.f32 %v3324, %v3325
  %v3327 = vsel %vm1205, %v1063, -inf
  %v3328 = vmax.f32 %v3326, %v3327
  %v3329 = vsel %vm1205, %v1196, -inf
  %v3330 = vmax.f32 %v3328, %v3329
  %v3331 = vsel %vm1205, %v133, -inf
  %v3332 = vsel %vm1205, %v266, -inf
  %v3333 = vmax.f32 %v3331, %v3332
  %v3334 = vsel %vm1205, %v399, -inf
  %v3335 = vmax.f32 %v3333, %v3334
  %v3336 = vsel %vm1205, %v532, -inf
  %v3337 = vmax.f32 %v3335, %v3336
  %v3338 = vsel %vm1205, %v665, -inf
  %v3339 = vmax.f32 %v3337, %v3338
  %v3340 = vsel %vm1205, %v798, -inf
  %v3341 = vmax.f32 %v3339, %v3340
  %v3342 = vsel %vm1205, %v931, -inf
  %v3343 = vmax.f32 %v3341, %v3342
  %v3344 = vsel %vm1205, %v1064, -inf
  %v3345 = vmax.f32 %v3343, %v3344
  %v3346 = vsel %vm1205, %v1197, -inf
  %v3347 = vmax.f32 %v3345, %v3346
  %v3348 = vsel %vm1205, %v134, -inf
  %v3349 = vsel %vm1205, %v267, -inf
  %v3350 = vmax.f32 %v3348, %v3349
  %v3351 = vsel %vm1205, %v400, -inf
  %v3352 = vmax.f32 %v3350, %v3351
  %v3353 = vsel %vm1205, %v533, -inf
  %v3354 = vmax.f32 %v3352, %v3353
  %v3355 = vsel %vm1205, %v666, -inf
  %v3356 = vmax.f32 %v3354, %v3355
  %v3357 = vsel %vm1205, %v799, -inf
  %v3358 = vmax.f32 %v3356, %v3357
  %v3359 = vsel %vm1205, %v932, -inf
  %v3360 = vmax.f32 %v3358, %v3359
  %v3361 = vsel %vm1205, %v1065, -inf
  %v3362 = vmax.f32 %v3360, %v3361
  %v3363 = vsel %vm1205, %v1198, -inf
  %v3364 = vmax.f32 %v3362, %v3363
  %v3365 = vsel %vm1205, %v135, -inf
  %v3366 = vsel %vm1205, %v268, -inf
  %v3367 = vmax.f32 %v3365, %v3366
  %v3368 = vsel %vm1205, %v401, -inf
  %v3369 = vmax.f32 %v3367, %v3368
  %v3370 = vsel %vm1205, %v534, -inf
  %v3371 = vmax.f32 %v3369, %v3370
  %v3372 = vsel %vm1205, %v667, -inf
  %v3373 = vmax.f32 %v3371, %v3372
  %v3374 = vsel %vm1205, %v800, -inf
  %v3375 = vmax.f32 %v3373, %v3374
  %v3376 = vsel %vm1205, %v933, -inf
  %v3377 = vmax.f32 %v3375, %v3376
  %v3378 = vsel %vm1205, %v1066, -inf
  %v3379 = vmax.f32 %v3377, %v3378
  %v3380 = vsel %vm1205, %v1199, -inf
  %v3381 = vmax.f32 %v3379, %v3380
  %v3382 = vsel %vm1205, %v136, -inf
  %v3383 = vsel %vm1205, %v269, -inf
  %v3384 = vmax.f32 %v3382, %v3383
  %v3385 = vsel %vm1205, %v402, -inf
  %v3386 = vmax.f32 %v3384, %v3385
  %v3387 = vsel %vm1205, %v535, -inf
  %v3388 = vmax.f32 %v3386, %v3387
  %v3389 = vsel %vm1205, %v668, -inf
  %v3390 = vmax.f32 %v3388, %v3389
  %v3391 = vsel %vm1205, %v801, -inf
  %v3392 = vmax.f32 %v3390, %v3391
  %v3393 = vsel %vm1205, %v934, -inf
  %v3394 = vmax.f32 %v3392, %v3393
  %v3395 = vsel %vm1205, %v1067, -inf
  %v3396 = vmax.f32 %v3394, %v3395
  %v3397 = vsel %vm1205, %v1200, -inf
  %v3398 = vmax.f32 %v3396, %v3397
  %v3399 = vsel %vm1205, %v137, -inf
  %v3400 = vsel %vm1205, %v270, -inf
  %v3401 = vmax.f32 %v3399, %v3400
  %v3402 = vsel %vm1205, %v403, -inf
  %v3403 = vmax.f32 %v3401, %v3402
  %v3404 = vsel %vm1205, %v536, -inf
  %v3405 = vmax.f32 %v3403, %v3404
  %v3406 = vsel %vm1205, %v669, -inf
  %v3407 = vmax.f32 %v3405, %v3406
  %v3408 = vsel %vm1205, %v802, -inf
  %v3409 = vmax.f32 %v3407, %v3408
  %v3410 = vsel %vm1205, %v935, -inf
  %v3411 = vmax.f32 %v3409, %v3410
  %v3412 = vsel %vm1205, %v1068, -inf
  %v3413 = vmax.f32 %v3411, %v3412
  %v3414 = vsel %vm1205, %v1201, -inf
  %v3415 = vmax.f32 %v3413, %v3414
  %v3416 = vsel %vm1205, %v138, -inf
  %v3417 = vsel %vm1205, %v271, -inf
  %v3418 = vmax.f32 %v3416, %v3417
  %v3419 = vsel %vm1205, %v404, -inf
  %v3420 = vmax.f32 %v3418, %v3419
  %v3421 = vsel %vm1205, %v537, -inf
  %v3422 = vmax.f32 %v3420, %v3421
  %v3423 = vsel %vm1205, %v670, -inf
  %v3424 = vmax.f32 %v3422, %v3423
  %v3425 = vsel %vm1205, %v803, -inf
  %v3426 = vmax.f32 %v3424, %v3425
  %v3427 = vsel %vm1205, %v936, -inf
  %v3428 = vmax.f32 %v3426, %v3427
  %v3429 = vsel %vm1205, %v1069, -inf
  %v3430 = vmax.f32 %v3428, %v3429
  %v3431 = vsel %vm1205, %v1202, -inf
  %v3432 = vmax.f32 %v3430, %v3431
  %v3433 = vsel %vm1205, %v139, -inf
  %v3434 = vsel %vm1205, %v272, -inf
  %v3435 = vmax.f32 %v3433, %v3434
  %v3436 = vsel %vm1205, %v405, -inf
  %v3437 = vmax.f32 %v3435, %v3436
  %v3438 = vsel %vm1205, %v538, -inf
  %v3439 = vmax.f32 %v3437, %v3438
  %v3440 = vsel %vm1205, %v671, -inf
  %v3441 = vmax.f32 %v3439, %v3440
  %v3442 = vsel %vm1205, %v804, -inf
  %v3443 = vmax.f32 %v3441, %v3442
  %v3444 = vsel %vm1205, %v937, -inf
  %v3445 = vmax.f32 %v3443, %v3444
  %v3446 = vsel %vm1205, %v1070, -inf
  %v3447 = vmax.f32 %v3445, %v3446
  %v3448 = vsel %vm1205, %v1203, -inf
  %v3449 = vmax.f32 %v3447, %v3448
  %vm3450 = vcmask 517120
  %v3451 = vsel %vm3450, %v140, -inf
  %v3452 = vsel %vm3450, %v273, -inf
  %v3453 = vmax.f32 %v3451, %v3452
  %v3454 = vsel %vm3450, %v406, -inf
  %v3455 = vmax.f32 %v3453, %v3454
  %v3456 = vsel %vm3450, %v539, -inf
  %v3457 = vmax.f32 %v3455, %v3456
  %v3458 = vsel %vm3450, %v672, -inf
  %v3459 = vmax.f32 %v3457, %v3458
  %v3460 = vsel %vm3450, %v805, -inf
  %v3461 = vmax.f32 %v3459, %v3460
  %v3462 = vsel %vm3450, %v938, -inf
  %v3463 = vmax.f32 %v3461, %v3462
  %v3464 = vsel %vm3450, %v1071, -inf
  %v3465 = vmax.f32 %v3463, %v3464
  %v3466 = vsel %vm3450, %v1204, -inf
  %v3467 = vmax.f32 %v3465, %v3466
  %3468 = vst.msk [vmem:[%s1] sm:$0xff] %vm1205, %v1222
  %3469 = vst.msk [vmem:[%s1 + $0x8] sm:$0xff] %vm1205, %v1239
  %3470 = vst.msk [vmem:[%s1 + $0x10] sm:$0xff] %vm1205, %v1256
  %3471 = vst.msk [vmem:[%s1 + $0x18] sm:$0xff] %vm1205, %v1273
  %3472 = vst.msk [vmem:[%s1 + $0x20] sm:$0xff] %vm1205, %v1290
  %3473 = vst.msk [vmem:[%s1 + $0x28] sm:$0xff] %vm1205, %v1307
  %3474 = vst.msk [vmem:[%s1 + $0x30] sm:$0xff] %vm1205, %v1324
  %3475 = vst.msk [vmem:[%s1 + $0x38] sm:$0xff] %vm1205, %v1341
  %3476 = vst.msk [vmem:[%s1 + $0x40] sm:$0xff] %vm1205, %v1358
  %3477 = vst.msk [vmem:[%s1 + $0x48] sm:$0xff] %vm1205, %v1375
  %3478 = vst.msk [vmem:[%s1 + $0x50] sm:$0xff] %vm1205, %v1392
  %3479 = vst.msk [vmem:[%s1 + $0x58] sm:$0xff] %vm1205, %v1409
  %3480 = vst.msk [vmem:[%s1 + $0x60] sm:$0xff] %vm1205, %v1426
  %3481 = vst.msk [vmem:[%s1 + $0x68] sm:$0xff] %vm1205, %v1443
  %3482 = vst.msk [vmem:[%s1 + $0x70] sm:$0xff] %vm1205, %v1460
  %3483 = vst.msk [vmem:[%s1 + $0x78] sm:$0xff] %vm1205, %v1477
  %3484 = vst.msk [vmem:[%s1 + $0x80] sm:$0xff] %vm1205, %v1494
  %3485 = vst.msk [vmem:[%s1 + $0x88] sm:$0xff] %vm1205, %v1511
  %3486 = vst.msk [vmem:[%s1 + $0x90] sm:$0xff] %vm1205, %v1528
  %3487 = vst.msk [vmem:[%s1 + $0x98] sm:$0xff] %vm1205, %v1545
  %3488 = vst.msk [vmem:[%s1 + $0xa0] sm:$0xff] %vm1205, %v1562
  %3489 = vst.msk [vmem:[%s1 + $0xa8] sm:$0xff] %vm1205, %v1579
  %3490 = vst.msk [vmem:[%s1 + $0xb0] sm:$0xff] %vm1205, %v1596
  %3491 = vst.msk [vmem:[%s1 + $0xb8] sm:$0xff] %vm1205, %v1613
  %3492 = vst.msk [vmem:[%s1 + $0xc0] sm:$0xff] %vm1205, %v1630
  %3493 = vst.msk [vmem:[%s1 + $0xc8] sm:$0xff] %vm1205, %v1647
  %3494 = vst.msk [vmem:[%s1 + $0xd0] sm:$0xff] %vm1205, %v1664
  %3495 = vst.msk [vmem:[%s1 + $0xd8] sm:$0xff] %vm1205, %v1681
  %3496 = vst.msk [vmem:[%s1 + $0xe0] sm:$0xff] %vm1205, %v1698
  %3497 = vst.msk [vmem:[%s1 + $0xe8] sm:$0xff] %vm1205, %v1715
  %3498 = vst.msk [vmem:[%s1 + $0xf0] sm:$0xff] %vm1205, %v1732
  %3499 = vst.msk [vmem:[%s1 + $0xf8] sm:$0xff] %vm1205, %v1749
  %3500 = vst.msk [vmem:[%s1 + $0x100] sm:$0xff] %vm1205, %v1766
  %3501 = vst.msk [vmem:[%s1 + $0x108] sm:$0xff] %vm1205, %v1783
  %3502 = vst.msk [vmem:[%s1 + $0x110] sm:$0xff] %vm1205, %v1800
  %3503 = vst.msk [vmem:[%s1 + $0x118] sm:$0xff] %vm1205, %v1817
  %3504 = vst.msk [vmem:[%s1 + $0x120] sm:$0xff] %vm1205, %v1834
  %3505 = vst.msk [vmem:[%s1 + $0x128] sm:$0xff] %vm1205, %v1851
  %3506 = vst.msk [vmem:[%s1 + $0x130] sm:$0xff] %vm1205, %v1868
  %3507 = vst.msk [vmem:[%s1 + $0x138] sm:$0xff] %vm1205, %v1885
  %3508 = vst.msk [vmem:[%s1 + $0x140] sm:$0xff] %vm1205, %v1902
  %3509 = vst.msk [vmem:[%s1 + $0x148] sm:$0xff] %vm1205, %v1919
  %3510 = vst.msk [vmem:[%s1 + $0x150] sm:$0xff] %vm1205, %v1936
  %3511 = vst.msk [vmem:[%s1 + $0x158] sm:$0xff] %vm1205, %v1953
  %3512 = vst.msk [vmem:[%s1 + $0x160] sm:$0xff] %vm1205, %v1970
  %3513 = vst.msk [vmem:[%s1 + $0x168] sm:$0xff] %vm1205, %v1987
  %3514 = vst.msk [vmem:[%s1 + $0x170] sm:$0xff] %vm1205, %v2004
  %3515 = vst.msk [vmem:[%s1 + $0x178] sm:$0xff] %vm1205, %v2021
  %3516 = vst.msk [vmem:[%s1 + $0x180] sm:$0xff] %vm1205, %v2038
  %3517 = vst.msk [vmem:[%s1 + $0x188] sm:$0xff] %vm1205, %v2055
  %3518 = vst.msk [vmem:[%s1 + $0x190] sm:$0xff] %vm1205, %v2072
  %3519 = vst.msk [vmem:[%s1 + $0x198] sm:$0xff] %vm1205, %v2089
  %3520 = vst.msk [vmem:[%s1 + $0x1a0] sm:$0xff] %vm1205, %v2106
  %3521 = vst.msk [vmem:[%s1 + $0x1a8] sm:$0xff] %vm1205, %v2123
  %3522 = vst.msk [vmem:[%s1 + $0x1b0] sm:$0xff] %vm1205, %v2140
  %3523 = vst.msk [vmem:[%s1 + $0x1b8] sm:$0xff] %vm1205, %v2157
  %3524 = vst.msk [vmem:[%s1 + $0x1c0] sm:$0xff] %vm1205, %v2174
  %3525 = vst.msk [vmem:[%s1 + $0x1c8] sm:$0xff] %vm1205, %v2191
  %3526 = vst.msk [vmem:[%s1 + $0x1d0] sm:$0xff] %vm1205, %v2208
  %3527 = vst.msk [vmem:[%s1 + $0x1d8] sm:$0xff] %vm1205, %v2225
  %3528 = vst.msk [vmem:[%s1 + $0x1e0] sm:$0xff] %vm1205, %v2242
  %3529 = vst.msk [vmem:[%s1 + $0x1e8] sm:$0xff] %vm1205, %v2259
  %3530 = vst.msk [vmem:[%s1 + $0x1f0] sm:$0xff] %vm1205, %v2276
  %3531 = vst.msk [vmem:[%s1 + $0x1f8] sm:$0xff] %vm1205, %v2293
  %3532 = vst.msk [vmem:[%s1 + $0x200] sm:$0xff] %vm1205, %v2310
  %3533 = vst.msk [vmem:[%s1 + $0x208] sm:$0xff] %vm1205, %v2327
  %3534 = vst.msk [vmem:[%s1 + $0x210] sm:$0xff] %vm1205, %v2344
  %3535 = vst.msk [vmem:[%s1 + $0x218] sm:$0xff] %vm1205, %v2361
  %3536 = vst.msk [vmem:[%s1 + $0x220] sm:$0xff] %vm1205, %v2378
  %3537 = vst.msk [vmem:[%s1 + $0x228] sm:$0xff] %vm1205, %v2395
  %3538 = vst.msk [vmem:[%s1 + $0x230] sm:$0xff] %vm1205, %v2412
  %3539 = vst.msk [vmem:[%s1 + $0x238] sm:$0xff] %vm1205, %v2429
  %3540 = vst.msk [vmem:[%s1 + $0x240] sm:$0xff] %vm1205, %v2446
  %3541 = vst.msk [vmem:[%s1 + $0x248] sm:$0xff] %vm1205, %v2463
  %3542 = vst.msk [vmem:[%s1 + $0x250] sm:$0xff] %vm1205, %v2480
  %3543 = vst.msk [vmem:[%s1 + $0x258] sm:$0xff] %vm1205, %v2497
  %3544 = vst.msk [vmem:[%s1 + $0x260] sm:$0xff] %vm1205, %v2514
  %3545 = vst.msk [vmem:[%s1 + $0x268] sm:$0xff] %vm1205, %v2531
  %3546 = vst.msk [vmem:[%s1 + $0x270] sm:$0xff] %vm1205, %v2548
  %3547 = vst.msk [vmem:[%s1 + $0x278] sm:$0xff] %vm1205, %v2565
  %3548 = vst.msk [vmem:[%s1 + $0x280] sm:$0xff] %vm1205, %v2582
  %3549 = vst.msk [vmem:[%s1 + $0x288] sm:$0xff] %vm1205, %v2599
  %3550 = vst.msk [vmem:[%s1 + $0x290] sm:$0xff] %vm1205, %v2616
  %3551 = vst.msk [vmem:[%s1 + $0x298] sm:$0xff] %vm1205, %v2633
  %3552 = vst.msk [vmem:[%s1 + $0x2a0] sm:$0xff] %vm1205, %v2650
  %3553 = vst.msk [vmem:[%s1 + $0x2a8] sm:$0xff] %vm1205, %v2667
  %3554 = vst.msk [vmem:[%s1 + $0x2b0] sm:$0xff] %vm1205, %v2684
  %3555 = vst.msk [vmem:[%s1 + $0x2b8] sm:$0xff] %vm1205, %v2701
  %3556 = vst.msk [vmem:[%s1 + $0x2c0] sm:$0xff] %vm1205, %v2718
  %3557 = vst.msk [vmem:[%s1 + $0x2c8] sm:$0xff] %vm1205, %v2735
  %3558 = vst.msk [vmem:[%s1 + $0x2d0] sm:$0xff] %vm1205, %v2752
  %3559 = vst.msk [vmem:[%s1 + $0x2d8] sm:$0xff] %vm1205, %v2769
  %3560 = vst.msk [vmem:[%s1 + $0x2e0] sm:$0xff] %vm1205, %v2786
  %3561 = vst.msk [vmem:[%s1 + $0x2e8] sm:$0xff] %vm1205, %v2803
  %3562 = vst.msk [vmem:[%s1 + $0x2f0] sm:$0xff] %vm1205, %v2820
  %3563 = vst.msk [vmem:[%s1 + $0x2f8] sm:$0xff] %vm1205, %v2837
  %3564 = vst.msk [vmem:[%s1 + $0x300] sm:$0xff] %vm1205, %v2854
  %3565 = vst.msk [vmem:[%s1 + $0x308] sm:$0xff] %vm1205, %v2871
  %3566 = vst.msk [vmem:[%s1 + $0x310] sm:$0xff] %vm1205, %v2888
  %3567 = vst.msk [vmem:[%s1 + $0x318] sm:$0xff] %vm1205, %v2905
  %3568 = vst.msk [vmem:[%s1 + $0x320] sm:$0xff] %vm1205, %v2922
  %3569 = vst.msk [vmem:[%s1 + $0x328] sm:$0xff] %vm1205, %v2939
  %3570 = vst.msk [vmem:[%s1 + $0x330] sm:$0xff] %vm1205, %v2956
  %3571 = vst.msk [vmem:[%s1 + $0x338] sm:$0xff] %vm1205, %v2973
  %3572 = vst.msk [vmem:[%s1 + $0x340] sm:$0xff] %vm1205, %v2990
  %3573 = vst.msk [vmem:[%s1 + $0x348] sm:$0xff] %vm1205, %v3007
  %3574 = vst.msk [vmem:[%s1 + $0x350] sm:$0xff] %vm1205, %v3024
  %3575 = vst.msk [vmem:[%s1 + $0x358] sm:$0xff] %vm1205, %v3041
  %3576 = vst.msk [vmem:[%s1 + $0x360] sm:$0xff] %vm1205, %v3058
  %3577 = vst.msk [vmem:[%s1 + $0x368] sm:$0xff] %vm1205, %v3075
  %3578 = vst.msk [vmem:[%s1 + $0x370] sm:$0xff] %vm1205, %v3092
  %3579 = vst.msk [vmem:[%s1 + $0x378] sm:$0xff] %vm1205, %v3109
  %3580 = vst.msk [vmem:[%s1 + $0x380] sm:$0xff] %vm1205, %v3126
  %3581 = vst.msk [vmem:[%s1 + $0x388] sm:$0xff] %vm1205, %v3143
  %3582 = vst.msk [vmem:[%s1 + $0x390] sm:$0xff] %vm1205, %v3160
  %3583 = vst.msk [vmem:[%s1 + $0x398] sm:$0xff] %vm1205, %v3177
  %3584 = vst.msk [vmem:[%s1 + $0x3a0] sm:$0xff] %vm1205, %v3194
  %3585 = vst.msk [vmem:[%s1 + $0x3a8] sm:$0xff] %vm1205, %v3211
  %3586 = vst.msk [vmem:[%s1 + $0x3b0] sm:$0xff] %vm1205, %v3228
  %3587 = vst.msk [vmem:[%s1 + $0x3b8] sm:$0xff] %vm1205, %v3245
  %3588 = vst.msk [vmem:[%s1 + $0x3c0] sm:$0xff] %vm1205, %v3262
  %3589 = vst.msk [vmem:[%s1 + $0x3c8] sm:$0xff] %vm1205, %v3279
  %3590 = vst.msk [vmem:[%s1 + $0x3d0] sm:$0xff] %vm1205, %v3296
  %3591 = vst.msk [vmem:[%s1 + $0x3d8] sm:$0xff] %vm1205, %v3313
  %3592 = vst.msk [vmem:[%s1 + $0x3e0] sm:$0xff] %vm1205, %v3330
  %3593 = vst.msk [vmem:[%s1 + $0x3e8] sm:$0xff] %vm1205, %v3347
  %3594 = vst.msk [vmem:[%s1 + $0x3f0] sm:$0xff] %vm1205, %v3364
  %3595 = vst.msk [vmem:[%s1 + $0x3f8] sm:$0xff] %vm1205, %v3381
  %3596 = vst.msk [vmem:[%s1 + $0x400] sm:$0xff] %vm1205, %v3398
  %3597 = vst.msk [vmem:[%s1 + $0x408] sm:$0xff] %vm1205, %v3415
  %3598 = vst.msk [vmem:[%s1 + $0x410] sm:$0xff] %vm1205, %v3432
  %3599 = vst.msk [vmem:[%s1 + $0x418] sm:$0xff] %vm1205, %v3449
  %3600 = vst.msk [vmem:[%s1 + $0x420] sm:$0x3] %vm3450, %v3467
  // Predicated region
  $region6: #{alexnet_forward_pallas.6} parent=0 // pred_check
    _
  $region7: #{alexnet_forward_pallas.6} parent=0 // pred_check_branch
    %3602 = sbr.rel (0) target = $region9
  $region8: #{alexnet_forward_pallas.6} parent=0 // pred_region
    _
  $region9: #{alexnet_forward_pallas.6} parent=0 // pred_fallthru
    _
  // Predicated region
  $region10: #{alexnet_forward_pallas.6} parent=0 // pred_check
    _
  $region11: #{alexnet_forward_pallas.6} parent=0 // pred_check_branch
    %3604 = sbr.rel (0) target = $region13
  $region12: #{alexnet_forward_pallas.6} parent=0 // pred_region
    _
  $region13: #{alexnet_forward_pallas.6} parent=0 // pred_fallthru
    _

// kernel: alexnet_forward_pallas.7
$region0: #{alexnet_forward_pallas.7}
  #allocation0 [shape = 'u32[]', space=smem, size = 0x4, offset = 0x4, fixed_abs, tag = 'smem constant byte address 0x4 - core index']
  #allocation1 [shape = 'u32[144,128]{1,0:T(1,128)}', space=vmem, size = 0x12000, scoped, tag = 'internal scratch']
  %s0 = inlined_call_operand.vmem [shape: f32[242,576], index: 0, kind: input, shape index: {}]
  %s1 = inlined_call_operand.vmem [shape: f32[576,128], index: 1, kind: input, shape index: {}]
  %s2 = inlined_call_operand.vmem [shape: f32[1,128], index: 2, kind: input, shape index: {}]
  %s3 = inlined_call_operand.vmem [shape: f32[242,128], index: 3, kind: output, shape index: {}]
  %s4 = sld [smem:[#allocation0]]
  $region22: #{alexnet_forward_pallas.7} parent=0
    _
  %s6 = ssub.s32 1, %s4
  %s7 = scalar_select 0, %s6, %s4
  // Predicated region
  $region2: #{alexnet_forward_pallas.7} parent=0 // pred_check
    _
  $region3: #{alexnet_forward_pallas.7} parent=0 // pred_check_branch
    %9 = sbr.rel (0) target = $region5
  $region4: #{alexnet_forward_pallas.7} parent=0 // pred_region
    _
  $region5: #{alexnet_forward_pallas.7} parent=0 // pred_fallthru
    _
  // Predicated region
  $region6: #{alexnet_forward_pallas.7} parent=0 // pred_check
    _
  $region7: #{alexnet_forward_pallas.7} parent=0 // pred_check_branch
    %11 = sbr.rel (0) target = $region9
  $region8: #{alexnet_forward_pallas.7} parent=0 // pred_region
    _
  $region9: #{alexnet_forward_pallas.7} parent=0 // pred_fallthru
    _
  // Predicated region
  $region10: #{alexnet_forward_pallas.7} parent=0 // pred_check
    _
  $region11: #{alexnet_forward_pallas.7} parent=0 // pred_check_branch
    %13 = sbr.rel (0) target = $region13
  $region12: #{alexnet_forward_pallas.7} parent=0 // pred_region
    _
  $region13: #{alexnet_forward_pallas.7} parent=0 // pred_fallthru
    _
  %v14 = vld [vmem:[%s0] sm:$0xff]
  %v15 = vld [vmem:[%s0 + $0x8] sm:$0xff]
  %v16 = vld [vmem:[%s0 + $0x10] sm:$0xff]
  %v17 = vld [vmem:[%s0 + $0x18] sm:$0xff]
  %v18 = vld [vmem:[%s0 + $0x20] sm:$0xff]
  %v19 = vld [vmem:[%s0 + $0x28] sm:$0xff]
  %v20 = vld [vmem:[%s0 + $0x30] sm:$0xff]
  %v21 = vld [vmem:[%s0 + $0x38] sm:$0xff]
  %v22 = vld [vmem:[%s0 + $0x40] sm:$0xff]
  %v23 = vld [vmem:[%s0 + $0x48] sm:$0xff]
  %v24 = vld [vmem:[%s0 + $0x50] sm:$0xff]
  %v25 = vld [vmem:[%s0 + $0x58] sm:$0xff]
  %v26 = vld [vmem:[%s0 + $0x60] sm:$0xff]
  %v27 = vld [vmem:[%s0 + $0x68] sm:$0xff]
  %v28 = vld [vmem:[%s0 + $0x70] sm:$0xff]
  %v29 = vld [vmem:[%s0 + $0x78] sm:$0xff]
  %v30 = vld [vmem:[%s0 + $0x80] sm:$0xff]
  %v31 = vld [vmem:[%s0 + $0x88] sm:$0xff]
  %v32 = vld [vmem:[%s0 + $0x90] sm:$0xff]
  %v33 = vld [vmem:[%s0 + $0x98] sm:$0xff]
  %v34 = vld [vmem:[%s0 + $0xa0] sm:$0xff]
  %v35 = vld [vmem:[%s0 + $0xa8] sm:$0xff]
  %v36 = vld [vmem:[%s0 + $0xb0] sm:$0xff]
  %v37 = vld [vmem:[%s0 + $0xb8] sm:$0xff]
  %v38 = vld [vmem:[%s0 + $0xc0] sm:$0xff]
  %v39 = vld [vmem:[%s0 + $0xc8] sm:$0xff]
  %v40 = vld [vmem:[%s0 + $0xd0] sm:$0xff]
  %v41 = vld [vmem:[%s0 + $0xd8] sm:$0xff]
  %v42 = vld [vmem:[%s0 + $0xe0] sm:$0xff]
  %v43 = vld [vmem:[%s0 + $0xe8] sm:$0xff]
  %v44 = vld [vmem:[%s0 + $0xf0] sm:$0xff]
  %v45 = vld [vmem:[%s0 + $0xf8] sm:$0xff]
  %v46 = vld [vmem:[%s0 + $0x100] sm:$0xff]
  %v47 = vld [vmem:[%s0 + $0x108] sm:$0xff]
  %v48 = vld [vmem:[%s0 + $0x110] sm:$0xff]
  %v49 = vld [vmem:[%s0 + $0x118] sm:$0xff]
  %v50 = vld [vmem:[%s0 + $0x120] sm:$0xff]
  %v51 = vld [vmem:[%s0 + $0x128] sm:$0xff]
  %v52 = vld [vmem:[%s0 + $0x130] sm:$0xff]
  %v53 = vld [vmem:[%s0 + $0x138] sm:$0xff]
  %v54 = vld [vmem:[%s0 + $0x140] sm:$0xff]
  %v55 = vld [vmem:[%s0 + $0x148] sm:$0xff]
  %v56 = vld [vmem:[%s0 + $0x150] sm:$0xff]
  %v57 = vld [vmem:[%s0 + $0x158] sm:$0xff]
  %v58 = vld [vmem:[%s0 + $0x160] sm:$0xff]
  %v59 = vld [vmem:[%s0 + $0x168] sm:$0xff]
  %v60 = vld [vmem:[%s0 + $0x170] sm:$0xff]
  %v61 = vld [vmem:[%s0 + $0x178] sm:$0xff]
  %v62 = vld [vmem:[%s0 + $0x180] sm:$0xff]
  %v63 = vld [vmem:[%s0 + $0x188] sm:$0xff]
  %v64 = vld [vmem:[%s0 + $0x190] sm:$0xff]
  %v65 = vld [vmem:[%s0 + $0x198] sm:$0xff]
  %v66 = vld [vmem:[%s0 + $0x1a0] sm:$0xff]
  %v67 = vld [vmem:[%s0 + $0x1a8] sm:$0xff]
  %v68 = vld [vmem:[%s0 + $0x1b0] sm:$0xff]
  %v69 = vld [vmem:[%s0 + $0x1b8] sm:$0xff]
  %v70 = vld [vmem:[%s0 + $0x1c0] sm:$0xff]
  %v71 = vld [vmem:[%s0 + $0x1c8] sm:$0xff]
  %v72 = vld [vmem:[%s0 + $0x1d0] sm:$0xff]
  %v73 = vld [vmem:[%s0 + $0x1d8] sm:$0xff]
  %v74 = vld [vmem:[%s0 + $0x1e0] sm:$0xff]
  %v75 = vld [vmem:[%s0 + $0x1e8] sm:$0xff]
  %v76 = vld [vmem:[%s0 + $0x1f0] sm:$0xff]
  %v77 = vld [vmem:[%s0 + $0x1f8] sm:$0xff]
  %v78 = vld [vmem:[%s0 + $0x200] sm:$0xff]
  %v79 = vld [vmem:[%s0 + $0x208] sm:$0xff]
  %v80 = vld [vmem:[%s0 + $0x210] sm:$0xff]
  %v81 = vld [vmem:[%s0 + $0x218] sm:$0xff]
  %v82 = vld [vmem:[%s0 + $0x220] sm:$0xff]
  %v83 = vld [vmem:[%s0 + $0x228] sm:$0xff]
  %v84 = vld [vmem:[%s0 + $0x230] sm:$0xff]
  %v85 = vld [vmem:[%s0 + $0x238] sm:$0xff]
  %v86 = vld [vmem:[%s0 + $0x240] sm:$0xff]
  %v87 = vld [vmem:[%s0 + $0x248] sm:$0xff]
  %v88 = vld [vmem:[%s0 + $0x250] sm:$0xff]
  %v89 = vld [vmem:[%s0 + $0x258] sm:$0xff]
  %v90 = vld [vmem:[%s0 + $0x260] sm:$0xff]
  %v91 = vld [vmem:[%s0 + $0x268] sm:$0xff]
  %v92 = vld [vmem:[%s0 + $0x270] sm:$0xff]
  %v93 = vld [vmem:[%s0 + $0x278] sm:$0xff]
  %v94 = vld [vmem:[%s0 + $0x280] sm:$0xff]
  %v95 = vld [vmem:[%s0 + $0x288] sm:$0xff]
  %v96 = vld [vmem:[%s0 + $0x290] sm:$0xff]
  %v97 = vld [vmem:[%s0 + $0x298] sm:$0xff]
  %v98 = vld [vmem:[%s0 + $0x2a0] sm:$0xff]
  %v99 = vld [vmem:[%s0 + $0x2a8] sm:$0xff]
  %v100 = vld [vmem:[%s0 + $0x2b0] sm:$0xff]
  %v101 = vld [vmem:[%s0 + $0x2b8] sm:$0xff]
  %v102 = vld [vmem:[%s0 + $0x2c0] sm:$0xff]
  %v103 = vld [vmem:[%s0 + $0x2c8] sm:$0xff]
  %v104 = vld [vmem:[%s0 + $0x2d0] sm:$0xff]
  %v105 = vld [vmem:[%s0 + $0x2d8] sm:$0xff]
  %v106 = vld [vmem:[%s0 + $0x2e0] sm:$0xff]
  %v107 = vld [vmem:[%s0 + $0x2e8] sm:$0xff]
  %v108 = vld [vmem:[%s0 + $0x2f0] sm:$0xff]
  %v109 = vld [vmem:[%s0 + $0x2f8] sm:$0xff]
  %v110 = vld [vmem:[%s0 + $0x300] sm:$0xff]
  %v111 = vld [vmem:[%s0 + $0x308] sm:$0xff]
  %v112 = vld [vmem:[%s0 + $0x310] sm:$0xff]
  %v113 = vld [vmem:[%s0 + $0x318] sm:$0xff]
  %v114 = vld [vmem:[%s0 + $0x320] sm:$0xff]
  %v115 = vld [vmem:[%s0 + $0x328] sm:$0xff]
  %v116 = vld [vmem:[%s0 + $0x330] sm:$0xff]
  %v117 = vld [vmem:[%s0 + $0x338] sm:$0xff]
  %v118 = vld [vmem:[%s0 + $0x340] sm:$0xff]
  %v119 = vld [vmem:[%s0 + $0x348] sm:$0xff]
  %v120 = vld [vmem:[%s0 + $0x350] sm:$0xff]
  %v121 = vld [vmem:[%s0 + $0x358] sm:$0xff]
  %v122 = vld [vmem:[%s0 + $0x360] sm:$0xff]
  %v123 = vld [vmem:[%s0 + $0x368] sm:$0xff]
  %v124 = vld [vmem:[%s0 + $0x370] sm:$0xff]
  %v125 = vld [vmem:[%s0 + $0x378] sm:$0xff]
  %v126 = vld [vmem:[%s0 + $0x380] sm:$0xff]
  %v127 = vld [vmem:[%s0 + $0x388] sm:$0xff]
  %v128 = vld [vmem:[%s0 + $0x390] sm:$0xff]
  %v129 = vld [vmem:[%s0 + $0x398] sm:$0xff]
  %v130 = vld [vmem:[%s0 + $0x3a0] sm:$0xff]
  %v131 = vld [vmem:[%s0 + $0x3a8] sm:$0xff]
  %v132 = vld [vmem:[%s0 + $0x3b0] sm:$0xff]
  %v133 = vld [vmem:[%s0 + $0x3b8] sm:$0xff]
  %v134 = vld [vmem:[%s0 + $0x3c0] sm:$0xff]
  %v135 = vld [vmem:[%s0 + $0x3c8] sm:$0xff]
  %v136 = vld [vmem:[%s0 + $0x3d0] sm:$0xff]
  %v137 = vld [vmem:[%s0 + $0x3d8] sm:$0xff]
  %v138 = vld [vmem:[%s0 + $0x3e0] sm:$0xff]
  %v139 = vld [vmem:[%s0 + $0x3e8] sm:$0xff]
  %v140 = vld [vmem:[%s0 + $0x3f0] sm:$0xff]
  %v141 = vld [vmem:[%s0 + $0x3f8] sm:$0xff]
  %v142 = vld [vmem:[%s0 + $0x400] sm:$0xff]
  %v143 = vld [vmem:[%s0 + $0x408] sm:$0xff]
  %v144 = vld [vmem:[%s0 + $0x410] sm:$0xff]
  %v145 = vld [vmem:[%s0 + $0x418] sm:$0xff]
  %v146 = vld [vmem:[%s0 + $0x420] sm:$0xff]
  %v147 = vld [vmem:[%s0 + $0x428] sm:$0xff]
  %v148 = vld [vmem:[%s0 + $0x430] sm:$0xff]
  %v149 = vld [vmem:[%s0 + $0x438] sm:$0xff]
  %v150 = vld [vmem:[%s0 + $0x440] sm:$0xff]
  %v151 = vld [vmem:[%s0 + $0x448] sm:$0xff]
  %v152 = vld [vmem:[%s0 + $0x450] sm:$0xff]
  %v153 = vld [vmem:[%s0 + $0x458] sm:$0xff]
  %v154 = vld [vmem:[%s0 + $0x460] sm:$0xff]
  %v155 = vld [vmem:[%s0 + $0x468] sm:$0xff]
  %v156 = vld [vmem:[%s0 + $0x470] sm:$0xff]
  %v157 = vld [vmem:[%s0 + $0x478] sm:$0xff]
  %v158 = vld [vmem:[%s0 + $0x480] sm:$0xff]
  %v159 = vld [vmem:[%s0 + $0x488] sm:$0xff]
  %v160 = vld [vmem:[%s0 + $0x490] sm:$0xff]
  %v161 = vld [vmem:[%s0 + $0x498] sm:$0xff]
  %v162 = vld [vmem:[%s0 + $0x4a0] sm:$0xff]
  %v163 = vld [vmem:[%s0 + $0x4a8] sm:$0xff]
  %v164 = vld [vmem:[%s0 + $0x4b0] sm:$0x3]
  %v165 = vld [vmem:[%s0 + $0x4b8] sm:$0x3]
  %v166 = vld [vmem:[%s0 + $0x4c0] sm:$0x3]
  %v167 = vld [vmem:[%s0 + $0x4c8] sm:$0x3]
  %v168 = vld [vmem:[%s0 + $0x4d0] sm:$0x3]
  %v169 = vld [vmem:[%s1] sm:$0xff]
  %v170 = vld [vmem:[%s1 + $0x8] sm:$0xff]
  %v171 = vld [vmem:[%s1 + $0x10] sm:$0xff]
  %v172 = vld [vmem:[%s1 + $0x18] sm:$0xff]
  %v173 = vld [vmem:[%s1 + $0x20] sm:$0xff]
  %v174 = vld [vmem:[%s1 + $0x28] sm:$0xff]
  %v175 = vld [vmem:[%s1 + $0x30] sm:$0xff]
  %v176 = vld [vmem:[%s1 + $0x38] sm:$0xff]
  %v177 = vld [vmem:[%s1 + $0x40] sm:$0xff]
  %v178 = vld [vmem:[%s1 + $0x48] sm:$0xff]
  %v179 = vld [vmem:[%s1 + $0x50] sm:$0xff]
  %v180 = vld [vmem:[%s1 + $0x58] sm:$0xff]
  %v181 = vld [vmem:[%s1 + $0x60] sm:$0xff]
  %v182 = vld [vmem:[%s1 + $0x68] sm:$0xff]
  %v183 = vld [vmem:[%s1 + $0x70] sm:$0xff]
  %v184 = vld [vmem:[%s1 + $0x78] sm:$0xff]
  %v185 = vld [vmem:[%s1 + $0x80] sm:$0xff]
  %v186 = vld [vmem:[%s1 + $0x88] sm:$0xff]
  %v187 = vld [vmem:[%s1 + $0x90] sm:$0xff]
  %v188 = vld [vmem:[%s1 + $0x98] sm:$0xff]
  %v189 = vld [vmem:[%s1 + $0xa0] sm:$0xff]
  %v190 = vld [vmem:[%s1 + $0xa8] sm:$0xff]
  %v191 = vld [vmem:[%s1 + $0xb0] sm:$0xff]
  %v192 = vld [vmem:[%s1 + $0xb8] sm:$0xff]
  %v193 = vld [vmem:[%s1 + $0xc0] sm:$0xff]
  %v194 = vld [vmem:[%s1 + $0xc8] sm:$0xff]
  %v195 = vld [vmem:[%s1 + $0xd0] sm:$0xff]
  %v196 = vld [vmem:[%s1 + $0xd8] sm:$0xff]
  %v197 = vld [vmem:[%s1 + $0xe0] sm:$0xff]
  %v198 = vld [vmem:[%s1 + $0xe8] sm:$0xff]
  %v199 = vld [vmem:[%s1 + $0xf0] sm:$0xff]
  %v200 = vld [vmem:[%s1 + $0xf8] sm:$0xff]
  %v201 = vld [vmem:[%s1 + $0x100] sm:$0xff]
  %v202 = vld [vmem:[%s1 + $0x108] sm:$0xff]
  %v203 = vld [vmem:[%s1 + $0x110] sm:$0xff]
  %v204 = vld [vmem:[%s1 + $0x118] sm:$0xff]
  %v205 = vld [vmem:[%s1 + $0x120] sm:$0xff]
  %v206 = vld [vmem:[%s1 + $0x128] sm:$0xff]
  %v207 = vld [vmem:[%s1 + $0x130] sm:$0xff]
  %v208 = vld [vmem:[%s1 + $0x138] sm:$0xff]
  %v209 = vld [vmem:[%s1 + $0x140] sm:$0xff]
  %v210 = vld [vmem:[%s1 + $0x148] sm:$0xff]
  %v211 = vld [vmem:[%s1 + $0x150] sm:$0xff]
  %v212 = vld [vmem:[%s1 + $0x158] sm:$0xff]
  %v213 = vld [vmem:[%s1 + $0x160] sm:$0xff]
  %v214 = vld [vmem:[%s1 + $0x168] sm:$0xff]
  %v215 = vld [vmem:[%s1 + $0x170] sm:$0xff]
  %v216 = vld [vmem:[%s1 + $0x178] sm:$0xff]
  %v217 = vld [vmem:[%s1 + $0x180] sm:$0xff]
  %v218 = vld [vmem:[%s1 + $0x188] sm:$0xff]
  %v219 = vld [vmem:[%s1 + $0x190] sm:$0xff]
  %v220 = vld [vmem:[%s1 + $0x198] sm:$0xff]
  %v221 = vld [vmem:[%s1 + $0x1a0] sm:$0xff]
  %v222 = vld [vmem:[%s1 + $0x1a8] sm:$0xff]
  %v223 = vld [vmem:[%s1 + $0x1b0] sm:$0xff]
  %v224 = vld [vmem:[%s1 + $0x1b8] sm:$0xff]
  %v225 = vld [vmem:[%s1 + $0x1c0] sm:$0xff]
  %v226 = vld [vmem:[%s1 + $0x1c8] sm:$0xff]
  %v227 = vld [vmem:[%s1 + $0x1d0] sm:$0xff]
  %v228 = vld [vmem:[%s1 + $0x1d8] sm:$0xff]
  %v229 = vld [vmem:[%s1 + $0x1e0] sm:$0xff]
  %v230 = vld [vmem:[%s1 + $0x1e8] sm:$0xff]
  %v231 = vld [vmem:[%s1 + $0x1f0] sm:$0xff]
  %v232 = vld [vmem:[%s1 + $0x1f8] sm:$0xff]
  %v233 = vld [vmem:[%s1 + $0x200] sm:$0xff]
  %v234 = vld [vmem:[%s1 + $0x208] sm:$0xff]
  %v235 = vld [vmem:[%s1 + $0x210] sm:$0xff]
  %v236 = vld [vmem:[%s1 + $0x218] sm:$0xff]
  %v237 = vld [vmem:[%s1 + $0x220] sm:$0xff]
  %v238 = vld [vmem:[%s1 + $0x228] sm:$0xff]
  %v239 = vld [vmem:[%s1 + $0x230] sm:$0xff]
  %v240 = vld [vmem:[%s1 + $0x238] sm:$0xff]
  %v241 = vld [vmem:[%s2] sm:$0x1]
  %v243 = vlaneseq
  %v244 = vshrl.u32 %v243, 7
  %v245 = vsub.s32 0, %v244
  %v246 = vrot.slane %v241, %v245
  %vm248 = vcmask 523264
  %v250 = vsel %vm248, %v18, 0
  %v253 = vsel %vm248, %v23, 0
  %v256 = vsel %vm248, %v28, 0
  %v259 = vsel %vm248, %v33, 0
  %v262 = vsel %vm248, %v38, 0
  %v265 = vsel %vm248, %v43, 0
  %v268 = vsel %vm248, %v48, 0
  %v271 = vsel %vm248, %v53, 0
  %v274 = vsel %vm248, %v58, 0
  %v277 = vsel %vm248, %v63, 0
  %v280 = vsel %vm248, %v68, 0
  %v283 = vsel %vm248, %v73, 0
  %v286 = vsel %vm248, %v78, 0
  %v289 = vsel %vm248, %v83, 0
  %v292 = vsel %vm248, %v88, 0
  %v295 = vsel %vm248, %v93, 0
  %v298 = vsel %vm248, %v98, 0
  %v301 = vsel %vm248, %v103, 0
  %v304 = vsel %vm248, %v108, 0
  %v307 = vsel %vm248, %v113, 0
  %v310 = vsel %vm248, %v118, 0
  %v313 = vsel %vm248, %v123, 0
  %v316 = vsel %vm248, %v128, 0
  %v319 = vsel %vm248, %v133, 0
  %v322 = vsel %vm248, %v138, 0
  %v325 = vsel %vm248, %v143, 0
  %v328 = vsel %vm248, %v148, 0
  %v331 = vsel %vm248, %v153, 0
  %v334 = vsel %vm248, %v158, 0
  %v337 = vsel %vm248, %v163, 0
  %v340 = vsel %vm248, %v168, 0
  %342 = vmatprep.subr.mxu0 0.0
  %343 = vmatpush1.msra.mxu0 %v169
  %344 = vmatprep.subr.mxu0 0.0
  %345 = vmatpush1.msra.mxu0 %v170
  %346 = vmatprep.subr.mxu0 0.0
  %347 = vmatpush1.msra.mxu0 %v171
  %348 = vmatprep.subr.mxu0 0.0
  %349 = vmatpush1.msra.mxu0 %v172
  %350 = vmatprep.subr.mxu0 0.0
  %351 = vmatpush1.msra.mxu0 %v173
  %352 = vmatprep.subr.mxu0 0.0
  %353 = vmatpush1.msra.mxu0 %v174
  %354 = vmatprep.subr.mxu0 0.0
  %355 = vmatpush1.msra.mxu0 %v175
  %356 = vmatprep.subr.mxu0 0.0
  %357 = vmatpush1.msra.mxu0 %v176
  %358 = vmatprep.subr.mxu0 0.0
  %359 = vmatpush1.msra.mxu0 %v177
  %360 = vmatprep.subr.mxu0 0.0
  %361 = vmatpush1.msra.mxu0 %v178
  %362 = vmatprep.subr.mxu0 0.0
  %363 = vmatpush1.msra.mxu0 %v179
  %364 = vmatprep.subr.mxu0 0.0
  %365 = vmatpush1.msra.mxu0 %v180
  %366 = vmatprep.subr.mxu0 0.0
  %367 = vmatpush1.msra.mxu0 %v181
  %368 = vmatprep.subr.mxu0 0.0
  %369 = vmatpush1.msra.mxu0 %v182
  %370 = vmatprep.subr.mxu0 0.0
  %371 = vmatpush1.msra.mxu0 %v183
  %372 = vmatprep.subr.mxu0 0.0
  %373 = vmatpush1.msra.mxu0 %v184
  %374 = vmatprep.subr.mxu0 0.0
  %375 = vmatpush1.msra.mxu0 %v185
  %376 = vmatprep.subr.mxu0 0.0
  %377 = vmatpush1.msra.mxu0 %v186
  %378 = vmatprep.subr.mxu0 0.0
  %379 = vmatpush1.msra.mxu0 %v187
  %380 = vmatprep.subr.mxu0 0.0
  %381 = vmatpush1.msra.mxu0 %v188
  %382 = vmatprep.subr.mxu0 0.0
  %383 = vmatpush1.msra.mxu0 %v189
  %384 = vmatprep.subr.mxu0 0.0
  %385 = vmatpush1.msra.mxu0 %v190
  %386 = vmatprep.subr.mxu0 0.0
  %387 = vmatpush1.msra.mxu0 %v191
  %388 = vmatprep.subr.mxu0 0.0
  %389 = vmatpush1.msra.mxu0 %v192
  %390 = vmatprep.subr.mxu0 0.0
  %391 = vmatpush1.msra.mxu0 %v193
  %392 = vmatprep.subr.mxu0 0.0
  %393 = vmatpush1.msra.mxu0 %v194
  %394 = vmatprep.subr.mxu0 0.0
  %395 = vmatpush1.msra.mxu0 %v195
  %396 = vmatprep.subr.mxu0 0.0
  %397 = vmatpush1.msra.mxu0 %v196
  %398 = vmatprep.subr.mxu0 0.0
  %399 = vmatpush1.msra.mxu0 %v197
  %400 = vmatprep.subr.mxu0 0.0
  %401 = vmatpush1.msra.mxu0 %v198
  %402 = vmatprep.subr.mxu0 0.0
  %403 = vmatpush1.msra.mxu0 %v199
  %404 = vmatprep.subr.mxu0 0.0
  %405 = vmatpush1.msra.mxu0 %v200
  %406 = vmatprep.mubr.f32.mxu0 %v15
  %407 = vmatmul.mubr.f32.gmra.mrb[0].mxu0 %v14
  %v408 = vpop.f32.mrb[0].mxu0
  %v409 = vadd.f32 %v246, %v408
  %v410 = vpop.f32.mrb[0].mxu0
  %411 = vmatprep.mubr.f32.mxu0 %v20
  %412 = vmatmul.mubr.f32.gmra.mrb[0].mxu0 %v19
  %v413 = vpop.f32.mrb[0].mxu0
  %v414 = vadd.f32 %v246, %v413
  %v415 = vpop.f32.mrb[0].mxu0
  %416 = vmatprep.mubr.f32.mxu0 %v25
  %417 = vmatmul.mubr.f32.gmra.mrb[0].mxu0 %v24
  %v418 = vpop.f32.mrb[0].mxu0
  %v419 = vadd.f32 %v246, %v418
  %v420 = vpop.f32.mrb[0].mxu0
  %421 = vmatprep.mubr.f32.mxu0 %v30
  %422 = vmatmul.mubr.f32.gmra.mrb[0].mxu0 %v29
  %v423 = vpop.f32.mrb[0].mxu0
  %v424 = vadd.f32 %v246, %v423
  %v425 = vpop.f32.mrb[0].mxu0
  %426 = vmatprep.mubr.f32.mxu0 %v35
  %427 = vmatmul.mubr.f32.gmra.mrb[0].mxu0 %v34
  %v428 = vpop.f32.mrb[0].mxu0
  %v429 = vadd.f32 %v246, %v428
  %v430 = vpop.f32.mrb[0].mxu0
  %431 = vmatprep.mubr.f32.mxu0 %v40
  %432 = vmatmul.mubr.f32.gmra.mrb[0].mxu0 %v39
  %v433 = vpop.f32.mrb[0].mxu0
  %v434 = vadd.f32 %v246, %v433
  %v435 = vpop.f32.mrb[0].mxu0
  %436 = vmatprep.mubr.f32.mxu0 %v45
  %437 = vmatmul.mubr.f32.gmra.mrb[0].mxu0 %v44
  %v438 = vpop.f32.mrb[0].mxu0
  %v439 = vadd.f32 %v246, %v438
  %v440 = vpop.f32.mrb[0].mxu0
  %441 = vmatprep.mubr.f32.mxu0 %v50
  %442 = vmatmul.mubr.f32.gmra.mrb[0].mxu0 %v49
  %v443 = vpop.f32.mrb[0].mxu0
  %v444 = vadd.f32 %v246, %v443
  %v445 = vpop.f32.mrb[0].mxu0
  %446 = vmatprep.mubr.f32.mxu0 %v55
  %447 = vmatmul.mubr.f32.gmra.mrb[0].mxu0 %v54
  %v448 = vpop.f32.mrb[0].mxu0
  %v449 = vadd.f32 %v246, %v448
  %v450 = vpop.f32.mrb[0].mxu0
  %451 = vmatprep.mubr.f32.mxu0 %v60
  %452 = vmatmul.mubr.f32.gmra.mrb[0].mxu0 %v59
  %v453 = vpop.f32.mrb[0].mxu0
  %v454 = vadd.f32 %v246, %v453
  %v455 = vpop.f32.mrb[0].mxu0
  %456 = vmatprep.mubr.f32.mxu0 %v65
  %457 = vmatmul.mubr.f32.gmra.mrb[0].mxu0 %v64
  %v458 = vpop.f32.mrb[0].mxu0
  %v459 = vadd.f32 %v246, %v458
  %v460 = vpop.f32.mrb[0].mxu0
  %461 = vmatprep.mubr.f32.mxu0 %v70
  %462 = vmatmul.mubr.f32.gmra.mrb[0].mxu0 %v69
  %v463 = vpop.f32.mrb[0].mxu0
  %v464 = vadd.f32 %v246, %v463
  %v465 = vpop.f32.mrb[0].mxu0
  %466 = vmatprep.mubr.f32.mxu0 %v75
  %467 = vmatmul.mubr.f32.gmra.mrb[0].mxu0 %v74
  %v468 = vpop.f32.mrb[0].mxu0
  %v469 = vadd.f32 %v246, %v468
  %v470 = vpop.f32.mrb[0].mxu0
  %471 = vmatprep.mubr.f32.mxu0 %v80
  %472 = vmatmul.mubr.f32.gmra.mrb[0].mxu0 %v79
  %v473 = vpop.f32.mrb[0].mxu0
  %v474 = vadd.f32 %v246, %v473
  %v475 = vpop.f32.mrb[0].mxu0
  %476 = vmatprep.mubr.f32.mxu0 %v85
  %477 = vmatmul.mubr.f32.gmra.mrb[0].mxu0 %v84
  %v478 = vpop.f32.mrb[0].mxu0
  %v479 = vadd.f32 %v246, %v478
  %v480 = vpop.f32.mrb[0].mxu0
  %481 = vmatprep.mubr.f32.mxu0 %v90
  %482 = vmatmul.mubr.f32.gmra.mrb[0].mxu0 %v89
  %v483 = vpop.f32.mrb[0].mxu0
  %v484 = vadd.f32 %v246, %v483
  %v485 = vpop.f32.mrb[0].mxu0
  %486 = vmatprep.mubr.f32.mxu0 %v95
  %487 = vmatmul.mubr.f32.gmra.mrb[0].mxu0 %v94
  %v488 = vpop.f32.mrb[0].mxu0
  %v489 = vadd.f32 %v246, %v488
  %v490 = vpop.f32.mrb[0].mxu0
  %491 = vmatprep.mubr.f32.mxu0 %v100
  %492 = vmatmul.mubr.f32.gmra.mrb[0].mxu0 %v99
  %v493 = vpop.f32.mrb[0].mxu0
  %v494 = vadd.f32 %v246, %v493
  %v495 = vpop.f32.mrb[0].mxu0
  %496 = vmatprep.mubr.f32.mxu0 %v105
  %497 = vmatmul.mubr.f32.gmra.mrb[0].mxu0 %v104
  %v498 = vpop.f32.mrb[0].mxu0
  %v499 = vadd.f32 %v246, %v498
  %v500 = vpop.f32.mrb[0].mxu0
  %501 = vmatprep.mubr.f32.mxu0 %v110
  %502 = vmatmul.mubr.f32.gmra.mrb[0].mxu0 %v109
  %v503 = vpop.f32.mrb[0].mxu0
  %v504 = vadd.f32 %v246, %v503
  %v505 = vpop.f32.mrb[0].mxu0
  %506 = vmatprep.mubr.f32.mxu0 %v115
  %507 = vmatmul.mubr.f32.gmra.mrb[0].mxu0 %v114
  %v508 = vpop.f32.mrb[0].mxu0
  %v509 = vadd.f32 %v246, %v508
  %v510 = vpop.f32.mrb[0].mxu0
  %511 = vmatprep.mubr.f32.mxu0 %v120
  %512 = vmatmul.mubr.f32.gmra.mrb[0].mxu0 %v119
  %v513 = vpop.f32.mrb[0].mxu0
  %v514 = vadd.f32 %v246, %v513
  %v515 = vpop.f32.mrb[0].mxu0
  %516 = vmatprep.mubr.f32.mxu0 %v125
  %517 = vmatmul.mubr.f32.gmra.mrb[0].mxu0 %v124
  %v518 = vpop.f32.mrb[0].mxu0
  %v519 = vadd.f32 %v246, %v518
  %v520 = vpop.f32.mrb[0].mxu0
  %521 = vmatprep.mubr.f32.mxu0 %v130
  %522 = vmatmul.mubr.f32.gmra.mrb[0].mxu0 %v129
  %v523 = vpop.f32.mrb[0].mxu0
  %v524 = vadd.f32 %v246, %v523
  %v525 = vpop.f32.mrb[0].mxu0
  %526 = vmatprep.mubr.f32.mxu0 %v135
  %527 = vmatmul.mubr.f32.gmra.mrb[0].mxu0 %v134
  %v528 = vpop.f32.mrb[0].mxu0
  %v529 = vadd.f32 %v246, %v528
  %v530 = vpop.f32.mrb[0].mxu0
  %531 = vmatprep.mubr.f32.mxu0 %v140
  %532 = vmatmul.mubr.f32.gmra.mrb[0].mxu0 %v139
  %v533 = vpop.f32.mrb[0].mxu0
  %v534 = vadd.f32 %v246, %v533
  %v535 = vpop.f32.mrb[0].mxu0
  %536 = vmatprep.mubr.f32.mxu0 %v145
  %537 = vmatmul.mubr.f32.gmra.mrb[0].mxu0 %v144
  %v538 = vpop.f32.mrb[0].mxu0
  %v539 = vadd.f32 %v246, %v538
  %v540 = vpop.f32.mrb[0].mxu0
  %541 = vmatprep.mubr.f32.mxu0 %v150
  %542 = vmatmul.mubr.f32.gmra.mrb[0].mxu0 %v149
  %v543 = vpop.f32.mrb[0].mxu0
  %v544 = vadd.f32 %v246, %v543
  %v545 = vpop.f32.mrb[0].mxu0
  %546 = vmatprep.mubr.f32.mxu0 %v155
  %547 = vmatmul.mubr.f32.gmra.mrb[0].mxu0 %v154
  %v548 = vpop.f32.mrb[0].mxu0
  %v549 = vadd.f32 %v246, %v548
  %v550 = vpop.f32.mrb[0].mxu0
  %551 = vmatprep.mubr.f32.mxu0 %v160
  %552 = vmatmul.mubr.f32.gmra.mrb[0].mxu0 %v159
  %v553 = vpop.f32.mrb[0].mxu0
  %v554 = vadd.f32 %v246, %v553
  %v555 = vpop.f32.mrb[0].mxu0
  %556 = vmatprep.mubr.f32.mxu0 %v165
  %557 = vmatmul.mubr.f32.gmra.mrb[0].mxu0 %v164
  %v558 = vpop.f32.mrb[0].mxu0
  %v559 = vadd.f32 %v246, %v558
  %v560 = vpop.f32.mrb[0].mxu0
  %561 = vdwg.mxu0
  %562 = vmatprep.subr.mxu0 0.0
  %563 = vmatpush1.msra.mxu0 %v201
  %564 = vmatprep.subr.mxu0 0.0
  %565 = vmatpush1.msra.mxu0 %v202
  %566 = vmatprep.subr.mxu0 0.0
  %567 = vmatpush1.msra.mxu0 %v203
  %568 = vmatprep.subr.mxu0 0.0
  %569 = vmatpush1.msra.mxu0 %v204
  %570 = vmatprep.subr.mxu0 0.0
  %571 = vmatpush1.msra.mxu0 %v205
  %572 = vmatprep.subr.mxu0 0.0
  %573 = vmatpush1.msra.mxu0 %v206
  %574 = vmatprep.subr.mxu0 0.0
  %575 = vmatpush1.msra.mxu0 %v207
  %576 = vmatprep.subr.mxu0 0.0
  %577 = vmatpush1.msra.mxu0 %v208
  %578 = vmatprep.subr.mxu0 0.0
  %579 = vmatpush1.msra.mxu0 %v209
  %580 = vmatprep.subr.mxu0 0.0
  %581 = vmatpush1.msra.mxu0 %v210
  %582 = vmatprep.subr.mxu0 0.0
  %583 = vmatpush1.msra.mxu0 %v211
  %584 = vmatprep.subr.mxu0 0.0
  %585 = vmatpush1.msra.mxu0 %v212
  %586 = vmatprep.subr.mxu0 0.0
  %587 = vmatpush1.msra.mxu0 %v213
  %588 = vmatprep.subr.mxu0 0.0
  %589 = vmatpush1.msra.mxu0 %v214
  %590 = vmatprep.subr.mxu0 0.0
  %591 = vmatpush1.msra.mxu0 %v215
  %592 = vmatprep.subr.mxu0 0.0
  %593 = vmatpush1.msra.mxu0 %v216
  %594 = vmatprep.subr.mxu0 0.0
  %595 = vmatpush1.msra.mxu0 %v217
  %596 = vmatprep.subr.mxu0 0.0
  %597 = vmatpush1.msra.mxu0 %v218
  %598 = vmatprep.subr.mxu0 0.0
  %599 = vmatpush1.msra.mxu0 %v219
  %600 = vmatprep.subr.mxu0 0.0
  %601 = vmatpush1.msra.mxu0 %v220
  %602 = vmatprep.subr.mxu0 0.0
  %603 = vmatpush1.msra.mxu0 %v221
  %604 = vmatprep.subr.mxu0 0.0
  %605 = vmatpush1.msra.mxu0 %v222
  %606 = vmatprep.subr.mxu0 0.0
  %607 = vmatpush1.msra.mxu0 %v223
  %608 = vmatprep.subr.mxu0 0.0
  %609 = vmatpush1.msra.mxu0 %v224
  %610 = vmatprep.subr.mxu0 0.0
  %611 = vmatpush1.msra.mxu0 %v225
  %612 = vmatprep.subr.mxu0 0.0
  %613 = vmatpush1.msra.mxu0 %v226
  %614 = vmatprep.subr.mxu0 0.0
  %615 = vmatpush1.msra.mxu0 %v227
  %616 = vmatprep.subr.mxu0 0.0
  %617 = vmatpush1.msra.mxu0 %v228
  %618 = vmatprep.subr.mxu0 0.0
  %619 = vmatpush1.msra.mxu0 %v229
  %620 = vmatprep.subr.mxu0 0.0
  %621 = vmatpush1.msra.mxu0 %v230
  %622 = vmatprep.subr.mxu0 0.0
  %623 = vmatpush1.msra.mxu0 %v231
  %624 = vmatprep.subr.mxu0 0.0
  %625 = vmatpush1.msra.mxu0 %v232
  %626 = vmatprep.mubr.f32.mxu0 %v17
  %627 = vmatmul.mubr.f32.gmra.mrb[0].mxu0 %v16
  %v628 = vpop.f32.mrb[0].mxu0
  %v629 = vadd.f32 %v409, %v628
  %v630 = vpop.f32.mrb[0].mxu0
  %631 = vmatprep.mubr.f32.mxu0 %v22
  %632 = vmatmul.mubr.f32.gmra.mrb[0].mxu0 %v21
  %v633 = vpop.f32.mrb[0].mxu0
  %v634 = vadd.f32 %v414, %v633
  %v635 = vpop.f32.mrb[0].mxu0
  %636 = vmatprep.mubr.f32.mxu0 %v27
  %637 = vmatmul.mubr.f32.gmra.mrb[0].mxu0 %v26
  %v638 = vpop.f32.mrb[0].mxu0
  %v639 = vadd.f32 %v419, %v638
  %v640 = vpop.f32.mrb[0].mxu0
  %641 = vmatprep.mubr.f32.mxu0 %v32
  %642 = vmatmul.mubr.f32.gmra.mrb[0].mxu0 %v31
  %v643 = vpop.f32.mrb[0].mxu0
  %v644 = vadd.f32 %v424, %v643
  %v645 = vpop.f32.mrb[0].mxu0
  %646 = vmatprep.mubr.f32.mxu0 %v37
  %647 = vmatmul.mubr.f32.gmra.mrb[0].mxu0 %v36
  %v648 = vpop.f32.mrb[0].mxu0
  %v649 = vadd.f32 %v429, %v648
  %v650 = vpop.f32.mrb[0].mxu0
  %651 = vmatprep.mubr.f32.mxu0 %v42
  %652 = vmatmul.mubr.f32.gmra.mrb[0].mxu0 %v41
  %v653 = vpop.f32.mrb[0].mxu0
  %v654 = vadd.f32 %v434, %v653
  %v655 = vpop.f32.mrb[0].mxu0
  %656 = vmatprep.mubr.f32.mxu0 %v47
  %657 = vmatmul.mubr.f32.gmra.mrb[0].mxu0 %v46
  %v658 = vpop.f32.mrb[0].mxu0
  %v659 = vadd.f32 %v439, %v658
  %v660 = vpop.f32.mrb[0].mxu0
  %661 = vmatprep.mubr.f32.mxu0 %v52
  %662 = vmatmul.mubr.f32.gmra.mrb[0].mxu0 %v51
  %v663 = vpop.f32.mrb[0].mxu0
  %v664 = vadd.f32 %v444, %v663
  %v665 = vpop.f32.mrb[0].mxu0
  %666 = vmatprep.mubr.f32.mxu0 %v57
  %667 = vmatmul.mubr.f32.gmra.mrb[0].mxu0 %v56
  %v668 = vpop.f32.mrb[0].mxu0
  %v669 = vadd.f32 %v449, %v668
  %v670 = vpop.f32.mrb[0].mxu0
  %671 = vmatprep.mubr.f32.mxu0 %v62
  %672 = vmatmul.mubr.f32.gmra.mrb[0].mxu0 %v61
  %v673 = vpop.f32.mrb[0].mxu0
  %v674 = vadd.f32 %v454, %v673
  %v675 = vpop.f32.mrb[0].mxu0
  %676 = vmatprep.mubr.f32.mxu0 %v67
  %677 = vmatmul.mubr.f32.gmra.mrb[0].mxu0 %v66
  %v678 = vpop.f32.mrb[0].mxu0
  %v679 = vadd.f32 %v459, %v678
  %v680 = vpop.f32.mrb[0].mxu0
  %681 = vmatprep.mubr.f32.mxu0 %v72
  %682 = vmatmul.mubr.f32.gmra.mrb[0].mxu0 %v71
  %v683 = vpop.f32.mrb[0].mxu0
  %v684 = vadd.f32 %v464, %v683
  %v685 = vpop.f32.mrb[0].mxu0
  %686 = vmatprep.mubr.f32.mxu0 %v77
  %687 = vmatmul.mubr.f32.gmra.mrb[0].mxu0 %v76
  %v688 = vpop.f32.mrb[0].mxu0
  %v689 = vadd.f32 %v469, %v688
  %v690 = vpop.f32.mrb[0].mxu0
  %691 = vmatprep.mubr.f32.mxu0 %v82
  %692 = vmatmul.mubr.f32.gmra.mrb[0].mxu0 %v81
  %v693 = vpop.f32.mrb[0].mxu0
  %v694 = vadd.f32 %v474, %v693
  %v695 = vpop.f32.mrb[0].mxu0
  %696 = vmatprep.mubr.f32.mxu0 %v87
  %697 = vmatmul.mubr.f32.gmra.mrb[0].mxu0 %v86
  %v698 = vpop.f32.mrb[0].mxu0
  %v699 = vadd.f32 %v479, %v698
  %v700 = vpop.f32.mrb[0].mxu0
  %701 = vmatprep.mubr.f32.mxu0 %v92
  %702 = vmatmul.mubr.f32.gmra.mrb[0].mxu0 %v91
  %v703 = vpop.f32.mrb[0].mxu0
  %v704 = vadd.f32 %v484, %v703
  %v705 = vpop.f32.mrb[0].mxu0
  %706 = vmatprep.mubr.f32.mxu0 %v97
  %707 = vmatmul.mubr.f32.gmra.mrb[0].mxu0 %v96
  %v708 = vpop.f32.mrb[0].mxu0
  %v709 = vadd.f32 %v489, %v708
  %v710 = vpop.f32.mrb[0].mxu0
  %711 = vmatprep.mubr.f32.mxu0 %v102
  %712 = vmatmul.mubr.f32.gmra.mrb[0].mxu0 %v101
  %v713 = vpop.f32.mrb[0].mxu0
  %v714 = vadd.f32 %v494, %v713
  %v715 = vpop.f32.mrb[0].mxu0
  %716 = vmatprep.mubr.f32.mxu0 %v107
  %717 = vmatmul.mubr.f32.gmra.mrb[0].mxu0 %v106
  %v718 = vpop.f32.mrb[0].mxu0
  %v719 = vadd.f32 %v499, %v718
  %v720 = vpop.f32.mrb[0].mxu0
  %721 = vmatprep.mubr.f32.mxu0 %v112
  %722 = vmatmul.mubr.f32.gmra.mrb[0].mxu0 %v111
  %v723 = vpop.f32.mrb[0].mxu0
  %v724 = vadd.f32 %v504, %v723
  %v725 = vpop.f32.mrb[0].mxu0
  %726 = vmatprep.mubr.f32.mxu0 %v117
  %727 = vmatmul.mubr.f32.gmra.mrb[0].mxu0 %v116
  %v728 = vpop.f32.mrb[0].mxu0
  %v729 = vadd.f32 %v509, %v728
  %v730 = vpop.f32.mrb[0].mxu0
  %731 = vmatprep.mubr.f32.mxu0 %v122
  %732 = vmatmul.mubr.f32.gmra.mrb[0].mxu0 %v121
  %v733 = vpop.f32.mrb[0].mxu0
  %v734 = vadd.f32 %v514, %v733
  %v735 = vpop.f32.mrb[0].mxu0
  %736 = vmatprep.mubr.f32.mxu0 %v127
  %737 = vmatmul.mubr.f32.gmra.mrb[0].mxu0 %v126
  %v738 = vpop.f32.mrb[0].mxu0
  %v739 = vadd.f32 %v519, %v738
  %v740 = vpop.f32.mrb[0].mxu0
  %741 = vmatprep.mubr.f32.mxu0 %v132
  %742 = vmatmul.mubr.f32.gmra.mrb[0].mxu0 %v131
  %v743 = vpop.f32.mrb[0].mxu0
  %v744 = vadd.f32 %v524, %v743
  %v745 = vpop.f32.mrb[0].mxu0
  %746 = vmatprep.mubr.f32.mxu0 %v137
  %747 = vmatmul.mubr.f32.gmra.mrb[0].mxu0 %v136
  %v748 = vpop.f32.mrb[0].mxu0
  %v749 = vadd.f32 %v529, %v748
  %v750 = vpop.f32.mrb[0].mxu0
  %751 = vmatprep.mubr.f32.mxu0 %v142
  %752 = vmatmul.mubr.f32.gmra.mrb[0].mxu0 %v141
  %v753 = vpop.f32.mrb[0].mxu0
  %v754 = vadd.f32 %v534, %v753
  %v755 = vpop.f32.mrb[0].mxu0
  %756 = vmatprep.mubr.f32.mxu0 %v147
  %757 = vmatmul.mubr.f32.gmra.mrb[0].mxu0 %v146
  %v758 = vpop.f32.mrb[0].mxu0
  %v759 = vadd.f32 %v539, %v758
  %v760 = vpop.f32.mrb[0].mxu0
  %761 = vmatprep.mubr.f32.mxu0 %v152
  %762 = vmatmul.mubr.f32.gmra.mrb[0].mxu0 %v151
  %v763 = vpop.f32.mrb[0].mxu0
  %v764 = vadd.f32 %v544, %v763
  %v765 = vpop.f32.mrb[0].mxu0
  %766 = vmatprep.mubr.f32.mxu0 %v157
  %767 = vmatmul.mubr.f32.gmra.mrb[0].mxu0 %v156
  %v768 = vpop.f32.mrb[0].mxu0
  %v769 = vadd.f32 %v549, %v768
  %v770 = vpop.f32.mrb[0].mxu0
  %771 = vmatprep.mubr.f32.mxu0 %v162
  %772 = vmatmul.mubr.f32.gmra.mrb[0].mxu0 %v161
  %v773 = vpop.f32.mrb[0].mxu0
  %v774 = vadd.f32 %v554, %v773
  %v775 = vpop.f32.mrb[0].mxu0
  %776 = vmatprep.mubr.f32.mxu0 %v167
  %777 = vmatmul.mubr.f32.gmra.mrb[0].mxu0 %v166
  %v778 = vpop.f32.mrb[0].mxu0
  %v779 = vadd.f32 %v559, %v778
  %v780 = vpop.f32.mrb[0].mxu0
  %781 = vdwg.mxu0
  %782 = vmatprep.subr.mxu0 0.0
  %783 = vmatpush1.msra.mxu0 %v233
  %784 = vmatprep.subr.mxu0 0.0
  %785 = vmatpush1.msra.mxu0 %v234
  %786 = vmatprep.subr.mxu0 0.0
  %787 = vmatpush1.msra.mxu0 %v235
  %788 = vmatprep.subr.mxu0 0.0
  %789 = vmatpush1.msra.mxu0 %v236
  %790 = vmatprep.subr.mxu0 0.0
  %791 = vmatpush1.msra.mxu0 %v237
  %792 = vmatprep.subr.mxu0 0.0
  %793 = vmatpush1.msra.mxu0 %v238
  %794 = vmatprep.subr.mxu0 0.0
  %795 = vmatpush1.msra.mxu0 %v239
  %796 = vmatprep.subr.mxu0 0.0
  %797 = vmatpush1.msra.mxu0 %v240
  %798 = vmatprep.subr.mxu0 0.0
  %799 = vmatpush1.msra.mxu0 0.0
  %800 = vmatprep.subr.mxu0 0.0
  %801 = vmatpush1.msra.mxu0 0.0
  %802 = vmatprep.subr.mxu0 0.0
  %803 = vmatpush1.msra.mxu0 0.0
  %804 = vmatprep.subr.mxu0 0.0
  %805 = vmatpush1.msra.mxu0 0.0
  %806 = vmatprep.subr.mxu0 0.0
  %807 = vmatpush1.msra.mxu0 0.0
  %808 = vmatprep.subr.mxu0 0.0
  %809 = vmatpush1.msra.mxu0 0.0
  %810 = vmatprep.subr.mxu0 0.0
  %811 = vmatpush1.msra.mxu0 0.0
  %812 = vmatprep.subr.mxu0 0.0
  %813 = vmatpush1.msra.mxu0 0.0
  %814 = vmatprep.subr.mxu0 0.0
  %815 = vmatpush1.msra.mxu0 0.0
  %816 = vmatprep.subr.mxu0 0.0
  %817 = vmatpush1.msra.mxu0 0.0
  %818 = vmatprep.subr.mxu0 0.0
  %819 = vmatpush1.msra.mxu0 0.0
  %820 = vmatprep.subr.mxu0 0.0
  %821 = vmatpush1.msra.mxu0 0.0
  %822 = vmatprep.subr.mxu0 0.0
  %823 = vmatpush1.msra.mxu0 0.0
  %824 = vmatprep.subr.mxu0 0.0
  %825 = vmatpush1.msra.mxu0 0.0
  %826 = vmatprep.subr.mxu0 0.0
  %827 = vmatpush1.msra.mxu0 0.0
  %828 = vmatprep.subr.mxu0 0.0
  %829 = vmatpush1.msra.mxu0 0.0
  %830 = vmatprep.subr.mxu0 0.0
  %831 = vmatpush1.msra.mxu0 0.0
  %832 = vmatprep.subr.mxu0 0.0
  %833 = vmatpush1.msra.mxu0 0.0
  %834 = vmatprep.subr.mxu0 0.0
  %835 = vmatpush1.msra.mxu0 0.0
  %836 = vmatprep.subr.mxu0 0.0
  %837 = vmatpush1.msra.mxu0 0.0
  %838 = vmatprep.subr.mxu0 0.0
  %839 = vmatpush1.msra.mxu0 0.0
  %840 = vmatprep.subr.mxu0 0.0
  %841 = vmatpush1.msra.mxu0 0.0
  %842 = vmatprep.subr.mxu0 0.0
  %843 = vmatpush1.msra.mxu0 0.0
  %844 = vmatprep.subr.mxu0 0.0
  %845 = vmatpush1.msra.mxu0 0.0
  %846 = vmatprep.mubr.f32.mxu0 0.0
  %847 = vmatmul.mubr.f32.gmra.mrb[0].mxu0 %v250
  %v848 = vpop.f32.mrb[0].mxu0
  %v849 = vadd.f32 %v629, %v848
  %v850 = vpop.f32.mrb[0].mxu0
  %851 = vmatprep.mubr.f32.mxu0 0.0
  %852 = vmatmul.mubr.f32.gmra.mrb[0].mxu0 %v253
  %v853 = vpop.f32.mrb[0].mxu0
  %v854 = vadd.f32 %v634, %v853
  %v855 = vpop.f32.mrb[0].mxu0
  %856 = vmatprep.mubr.f32.mxu0 0.0
  %857 = vmatmul.mubr.f32.gmra.mrb[0].mxu0 %v256
  %v858 = vpop.f32.mrb[0].mxu0
  %v859 = vadd.f32 %v639, %v858
  %v860 = vpop.f32.mrb[0].mxu0
  %861 = vmatprep.mubr.f32.mxu0 0.0
  %862 = vmatmul.mubr.f32.gmra.mrb[0].mxu0 %v259
  %v863 = vpop.f32.mrb[0].mxu0
  %v864 = vadd.f32 %v644, %v863
  %v865 = vpop.f32.mrb[0].mxu0
  %866 = vmatprep.mubr.f32.mxu0 0.0
  %867 = vmatmul.mubr.f32.gmra.mrb[0].mxu0 %v262
  %v868 = vpop.f32.mrb[0].mxu0
  %v869 = vadd.f32 %v649, %v868
  %v870 = vpop.f32.mrb[0].mxu0
  %871 = vmatprep.mubr.f32.mxu0 0.0
  %872 = vmatmul.mubr.f32.gmra.mrb[0].mxu0 %v265
  %v873 = vpop.f32.mrb[0].mxu0
  %v874 = vadd.f32 %v654, %v873
  %v875 = vpop.f32.mrb[0].mxu0
  %876 = vmatprep.mubr.f32.mxu0 0.0
  %877 = vmatmul.mubr.f32.gmra.mrb[0].mxu0 %v268
  %v878 = vpop.f32.mrb[0].mxu0
  %v879 = vadd.f32 %v659, %v878
  %v880 = vpop.f32.mrb[0].mxu0
  %881 = vmatprep.mubr.f32.mxu0 0.0
  %882 = vmatmul.mubr.f32.gmra.mrb[0].mxu0 %v271
  %v883 = vpop.f32.mrb[0].mxu0
  %v884 = vadd.f32 %v664, %v883
  %v885 = vpop.f32.mrb[0].mxu0
  %886 = vmatprep.mubr.f32.mxu0 0.0
  %887 = vmatmul.mubr.f32.gmra.mrb[0].mxu0 %v274
  %v888 = vpop.f32.mrb[0].mxu0
  %v889 = vadd.f32 %v669, %v888
  %v890 = vpop.f32.mrb[0].mxu0
  %891 = vmatprep.mubr.f32.mxu0 0.0
  %892 = vmatmul.mubr.f32.gmra.mrb[0].mxu0 %v277
  %v893 = vpop.f32.mrb[0].mxu0
  %v894 = vadd.f32 %v674, %v893
  %v895 = vpop.f32.mrb[0].mxu0
  %896 = vmatprep.mubr.f32.mxu0 0.0
  %897 = vmatmul.mubr.f32.gmra.mrb[0].mxu0 %v280
  %v898 = vpop.f32.mrb[0].mxu0
  %v899 = vadd.f32 %v679, %v898
  %v900 = vpop.f32.mrb[0].mxu0
  %901 = vmatprep.mubr.f32.mxu0 0.0
  %902 = vmatmul.mubr.f32.gmra.mrb[0].mxu0 %v283
  %v903 = vpop.f32.mrb[0].mxu0
  %v904 = vadd.f32 %v684, %v903
  %v905 = vpop.f32.mrb[0].mxu0
  %906 = vmatprep.mubr.f32.mxu0 0.0
  %907 = vmatmul.mubr.f32.gmra.mrb[0].mxu0 %v286
  %v908 = vpop.f32.mrb[0].mxu0
  %v909 = vadd.f32 %v689, %v908
  %v910 = vpop.f32.mrb[0].mxu0
  %911 = vmatprep.mubr.f32.mxu0 0.0
  %912 = vmatmul.mubr.f32.gmra.mrb[0].mxu0 %v289
  %v913 = vpop.f32.mrb[0].mxu0
  %v914 = vadd.f32 %v694, %v913
  %v915 = vpop.f32.mrb[0].mxu0
  %916 = vmatprep.mubr.f32.mxu0 0.0
  %917 = vmatmul.mubr.f32.gmra.mrb[0].mxu0 %v292
  %v918 = vpop.f32.mrb[0].mxu0
  %v919 = vadd.f32 %v699, %v918
  %v920 = vpop.f32.mrb[0].mxu0
  %921 = vmatprep.mubr.f32.mxu0 0.0
  %922 = vmatmul.mubr.f32.gmra.mrb[0].mxu0 %v295
  %v923 = vpop.f32.mrb[0].mxu0
  %v924 = vadd.f32 %v704, %v923
  %v925 = vpop.f32.mrb[0].mxu0
  %926 = vmatprep.mubr.f32.mxu0 0.0
  %927 = vmatmul.mubr.f32.gmra.mrb[0].mxu0 %v298
  %v928 = vpop.f32.mrb[0].mxu0
  %v929 = vadd.f32 %v709, %v928
  %v930 = vpop.f32.mrb[0].mxu0
  %931 = vmatprep.mubr.f32.mxu0 0.0
  %932 = vmatmul.mubr.f32.gmra.mrb[0].mxu0 %v301
  %v933 = vpop.f32.mrb[0].mxu0
  %v934 = vadd.f32 %v714, %v933
  %v935 = vpop.f32.mrb[0].mxu0
  %936 = vmatprep.mubr.f32.mxu0 0.0
  %937 = vmatmul.mubr.f32.gmra.mrb[0].mxu0 %v304
  %v938 = vpop.f32.mrb[0].mxu0
  %v939 = vadd.f32 %v719, %v938
  %v940 = vpop.f32.mrb[0].mxu0
  %941 = vmatprep.mubr.f32.mxu0 0.0
  %942 = vmatmul.mubr.f32.gmra.mrb[0].mxu0 %v307
  %v943 = vpop.f32.mrb[0].mxu0
  %v944 = vadd.f32 %v724, %v943
  %v945 = vpop.f32.mrb[0].mxu0
  %946 = vmatprep.mubr.f32.mxu0 0.0
  %947 = vmatmul.mubr.f32.gmra.mrb[0].mxu0 %v310
  %v948 = vpop.f32.mrb[0].mxu0
  %v949 = vadd.f32 %v729, %v948
  %v950 = vpop.f32.mrb[0].mxu0
  %951 = vmatprep.mubr.f32.mxu0 0.0
  %952 = vmatmul.mubr.f32.gmra.mrb[0].mxu0 %v313
  %v953 = vpop.f32.mrb[0].mxu0
  %v954 = vadd.f32 %v734, %v953
  %v955 = vpop.f32.mrb[0].mxu0
  %956 = vmatprep.mubr.f32.mxu0 0.0
  %957 = vmatmul.mubr.f32.gmra.mrb[0].mxu0 %v316
  %v958 = vpop.f32.mrb[0].mxu0
  %v959 = vadd.f32 %v739, %v958
  %v960 = vpop.f32.mrb[0].mxu0
  %961 = vmatprep.mubr.f32.mxu0 0.0
  %962 = vmatmul.mubr.f32.gmra.mrb[0].mxu0 %v319
  %v963 = vpop.f32.mrb[0].mxu0
  %v964 = vadd.f32 %v744, %v963
  %v965 = vpop.f32.mrb[0].mxu0
  %966 = vmatprep.mubr.f32.mxu0 0.0
  %967 = vmatmul.mubr.f32.gmra.mrb[0].mxu0 %v322
  %v968 = vpop.f32.mrb[0].mxu0
  %v969 = vadd.f32 %v749, %v968
  %v970 = vpop.f32.mrb[0].mxu0
  %971 = vmatprep.mubr.f32.mxu0 0.0
  %972 = vmatmul.mubr.f32.gmra.mrb[0].mxu0 %v325
  %v973 = vpop.f32.mrb[0].mxu0
  %v974 = vadd.f32 %v754, %v973
  %v975 = vpop.f32.mrb[0].mxu0
  %976 = vmatprep.mubr.f32.mxu0 0.0
  %977 = vmatmul.mubr.f32.gmra.mrb[0].mxu0 %v328
  %v978 = vpop.f32.mrb[0].mxu0
  %v979 = vadd.f32 %v759, %v978
  %v980 = vpop.f32.mrb[0].mxu0
  %981 = vmatprep.mubr.f32.mxu0 0.0
  %982 = vmatmul.mubr.f32.gmra.mrb[0].mxu0 %v331
  %v983 = vpop.f32.mrb[0].mxu0
  %v984 = vadd.f32 %v764, %v983
  %v985 = vpop.f32.mrb[0].mxu0
  %986 = vmatprep.mubr.f32.mxu0 0.0
  %987 = vmatmul.mubr.f32.gmra.mrb[0].mxu0 %v334
  %v988 = vpop.f32.mrb[0].mxu0
  %v989 = vadd.f32 %v769, %v988
  %v990 = vpop.f32.mrb[0].mxu0
  %991 = vmatprep.mubr.f32.mxu0 0.0
  %992 = vmatmul.mubr.f32.gmra.mrb[0].mxu0 %v337
  %v993 = vpop.f32.mrb[0].mxu0
  %v994 = vadd.f32 %v774, %v993
  %v995 = vpop.f32.mrb[0].mxu0
  %996 = vmatprep.mubr.f32.mxu0 0.0
  %997 = vmatmul.mubr.f32.gmra.mrb[0].mxu0 %v340
  %v998 = vpop.f32.mrb[0].mxu0
  %v999 = vadd.f32 %v779, %v998
  %v1000 = vpop.f32.mrb[0].mxu0
  %1001 = vdwg.mxu0
  %v1002 = vmax.f32 %v849, 0.0
  %v1003 = vmax.f32 %v854, 0.0
  %v1004 = vmax.f32 %v859, 0.0
  %v1005 = vmax.f32 %v864, 0.0
  %v1006 = vmax.f32 %v869, 0.0
  %v1007 = vmax.f32 %v874, 0.0
  %v1008 = vmax.f32 %v879, 0.0
  %v1009 = vmax.f32 %v884, 0.0
  %v1010 = vmax.f32 %v889, 0.0
  %v1011 = vmax.f32 %v894, 0.0
  %v1012 = vmax.f32 %v899, 0.0
  %v1013 = vmax.f32 %v904, 0.0
  %v1014 = vmax.f32 %v909, 0.0
  %v1015 = vmax.f32 %v914, 0.0
  %v1016 = vmax.f32 %v919, 0.0
  %v1017 = vmax.f32 %v924, 0.0
  %v1018 = vmax.f32 %v929, 0.0
  %v1019 = vmax.f32 %v934, 0.0
  %v1020 = vmax.f32 %v939, 0.0
  %v1021 = vmax.f32 %v944, 0.0
  %v1022 = vmax.f32 %v949, 0.0
  %v1023 = vmax.f32 %v954, 0.0
  %v1024 = vmax.f32 %v959, 0.0
  %v1025 = vmax.f32 %v964, 0.0
  %v1026 = vmax.f32 %v969, 0.0
  %v1027 = vmax.f32 %v974, 0.0
  %v1028 = vmax.f32 %v979, 0.0
  %v1029 = vmax.f32 %v984, 0.0
  %v1030 = vmax.f32 %v989, 0.0
  %v1031 = vmax.f32 %v994, 0.0
  %v1032 = vmax.f32 %v999, 0.0
  %1033 = vst [vmem:[%s3] sm:$0xff] %v1002
  %1034 = vst [vmem:[%s3 + $0x8] sm:$0xff] %v1003
  %1035 = vst [vmem:[%s3 + $0x10] sm:$0xff] %v1004
  %1036 = vst [vmem:[%s3 + $0x18] sm:$0xff] %v1005
  %1037 = vst [vmem:[%s3 + $0x20] sm:$0xff] %v1006
  %1038 = vst [vmem:[%s3 + $0x28] sm:$0xff] %v1007
  %1039 = vst [vmem:[%s3 + $0x30] sm:$0xff] %v1008
  %1040 = vst [vmem:[%s3 + $0x38] sm:$0xff] %v1009
  %1041 = vst [vmem:[%s3 + $0x40] sm:$0xff] %v1010
  %1042 = vst [vmem:[%s3 + $0x48] sm:$0xff] %v1011
  %1043 = vst [vmem:[%s3 + $0x50] sm:$0xff] %v1012
  %1044 = vst [vmem:[%s3 + $0x58] sm:$0xff] %v1013
  %1045 = vst [vmem:[%s3 + $0x60] sm:$0xff] %v1014
  %1046 = vst [vmem:[%s3 + $0x68] sm:$0xff] %v1015
  %1047 = vst [vmem:[%s3 + $0x70] sm:$0xff] %v1016
  %1048 = vst [vmem:[%s3 + $0x78] sm:$0xff] %v1017
  %1049 = vst [vmem:[%s3 + $0x80] sm:$0xff] %v1018
  %1050 = vst [vmem:[%s3 + $0x88] sm:$0xff] %v1019
  %1051 = vst [vmem:[%s3 + $0x90] sm:$0xff] %v1020
  %1052 = vst [vmem:[%s3 + $0x98] sm:$0xff] %v1021
  %1053 = vst [vmem:[%s3 + $0xa0] sm:$0xff] %v1022
  %1054 = vst [vmem:[%s3 + $0xa8] sm:$0xff] %v1023
  %1055 = vst [vmem:[%s3 + $0xb0] sm:$0xff] %v1024
  %1056 = vst [vmem:[%s3 + $0xb8] sm:$0xff] %v1025
  %1057 = vst [vmem:[%s3 + $0xc0] sm:$0xff] %v1026
  %1058 = vst [vmem:[%s3 + $0xc8] sm:$0xff] %v1027
  %1059 = vst [vmem:[%s3 + $0xd0] sm:$0xff] %v1028
  %1060 = vst [vmem:[%s3 + $0xd8] sm:$0xff] %v1029
  %1061 = vst [vmem:[%s3 + $0xe0] sm:$0xff] %v1030
  %1062 = vst [vmem:[%s3 + $0xe8] sm:$0xff] %v1031
  %1063 = vst [vmem:[%s3 + $0xf0] sm:$0x3] %v1032
  // Predicated region
  $region14: #{alexnet_forward_pallas.7} parent=0 // pred_check
    _
  $region15: #{alexnet_forward_pallas.7} parent=0 // pred_check_branch
    %1065 = sbr.rel (0) target = $region17
  $region16: #{alexnet_forward_pallas.7} parent=0 // pred_region
    _
  $region17: #{alexnet_forward_pallas.7} parent=0 // pred_fallthru
    _
  // Predicated region
  $region18: #{alexnet_forward_pallas.7} parent=0 // pred_check
    _
  $region19: #{alexnet_forward_pallas.7} parent=0 // pred_check_branch
    %1067 = sbr.rel (0) target = $region21
  $region20: #{alexnet_forward_pallas.7} parent=0 // pred_region
    _
  $region21: #{alexnet_forward_pallas.7} parent=0 // pred_fallthru
    _

// kernel: alexnet_forward_pallas.8
$region0: #{alexnet_forward_pallas.8}
  #allocation0 [shape = 'u32[]', space=smem, size = 0x4, offset = 0x4, fixed_abs, tag = 'smem constant byte address 0x4 - core index']
  #allocation1 [shape = 'u32[144,128]{1,0:T(1,128)}', space=vmem, size = 0x12000, scoped, tag = 'internal scratch']
  %s0 = inlined_call_operand.vmem [shape: f32[9,50,128], index: 0, kind: input, shape index: {}]
  %s1 = inlined_call_operand.vmem [shape: f32[50,128], index: 1, kind: output, shape index: {}]
  %s2 = sld [smem:[#allocation0]]
  $region14: #{alexnet_forward_pallas.8} parent=0
    _
  %s4 = ssub.s32 1, %s2
  %s5 = scalar_select 0, %s4, %s2
  // Predicated region
  $region2: #{alexnet_forward_pallas.8} parent=0 // pred_check
    _
  $region3: #{alexnet_forward_pallas.8} parent=0 // pred_check_branch
    %7 = sbr.rel (0) target = $region5
  $region4: #{alexnet_forward_pallas.8} parent=0 // pred_region
    _
  $region5: #{alexnet_forward_pallas.8} parent=0 // pred_fallthru
    _
  %v8 = vld [vmem:[%s0] sm:$0xff]
  %v9 = vld [vmem:[%s0 + $0x8] sm:$0xff]
  %v10 = vld [vmem:[%s0 + $0x10] sm:$0xff]
  %v11 = vld [vmem:[%s0 + $0x18] sm:$0xff]
  %v12 = vld [vmem:[%s0 + $0x20] sm:$0xff]
  %v13 = vld [vmem:[%s0 + $0x28] sm:$0xff]
  %v14 = vld [vmem:[%s0 + $0x30] sm:$0x3]
  %v15 = vld [vmem:[%s0 + $0x38] sm:$0xff]
  %v16 = vld [vmem:[%s0 + $0x40] sm:$0xff]
  %v17 = vld [vmem:[%s0 + $0x48] sm:$0xff]
  %v18 = vld [vmem:[%s0 + $0x50] sm:$0xff]
  %v19 = vld [vmem:[%s0 + $0x58] sm:$0xff]
  %v20 = vld [vmem:[%s0 + $0x60] sm:$0xff]
  %v21 = vld [vmem:[%s0 + $0x68] sm:$0x3]
  %v22 = vld [vmem:[%s0 + $0x70] sm:$0xff]
  %v23 = vld [vmem:[%s0 + $0x78] sm:$0xff]
  %v24 = vld [vmem:[%s0 + $0x80] sm:$0xff]
  %v25 = vld [vmem:[%s0 + $0x88] sm:$0xff]
  %v26 = vld [vmem:[%s0 + $0x90] sm:$0xff]
  %v27 = vld [vmem:[%s0 + $0x98] sm:$0xff]
  %v28 = vld [vmem:[%s0 + $0xa0] sm:$0x3]
  %v29 = vld [vmem:[%s0 + $0xa8] sm:$0xff]
  %v30 = vld [vmem:[%s0 + $0xb0] sm:$0xff]
  %v31 = vld [vmem:[%s0 + $0xb8] sm:$0xff]
  %v32 = vld [vmem:[%s0 + $0xc0] sm:$0xff]
  %v33 = vld [vmem:[%s0 + $0xc8] sm:$0xff]
  %v34 = vld [vmem:[%s0 + $0xd0] sm:$0xff]
  %v35 = vld [vmem:[%s0 + $0xd8] sm:$0x3]
  %v36 = vld [vmem:[%s0 + $0xe0] sm:$0xff]
  %v37 = vld [vmem:[%s0 + $0xe8] sm:$0xff]
  %v38 = vld [vmem:[%s0 + $0xf0] sm:$0xff]
  %v39 = vld [vmem:[%s0 + $0xf8] sm:$0xff]
  %v40 = vld [vmem:[%s0 + $0x100] sm:$0xff]
  %v41 = vld [vmem:[%s0 + $0x108] sm:$0xff]
  %v42 = vld [vmem:[%s0 + $0x110] sm:$0x3]
  %v43 = vld [vmem:[%s0 + $0x118] sm:$0xff]
  %v44 = vld [vmem:[%s0 + $0x120] sm:$0xff]
  %v45 = vld [vmem:[%s0 + $0x128] sm:$0xff]
  %v46 = vld [vmem:[%s0 + $0x130] sm:$0xff]
  %v47 = vld [vmem:[%s0 + $0x138] sm:$0xff]
  %v48 = vld [vmem:[%s0 + $0x140] sm:$0xff]
  %v49 = vld [vmem:[%s0 + $0x148] sm:$0x3]
  %v50 = vld [vmem:[%s0 + $0x150] sm:$0xff]
  %v51 = vld [vmem:[%s0 + $0x158] sm:$0xff]
  %v52 = vld [vmem:[%s0 + $0x160] sm:$0xff]
  %v53 = vld [vmem:[%s0 + $0x168] sm:$0xff]
  %v54 = vld [vmem:[%s0 + $0x170] sm:$0xff]
  %v55 = vld [vmem:[%s0 + $0x178] sm:$0xff]
  %v56 = vld [vmem:[%s0 + $0x180] sm:$0x3]
  %v57 = vld [vmem:[%s0 + $0x188] sm:$0xff]
  %v58 = vld [vmem:[%s0 + $0x190] sm:$0xff]
  %v59 = vld [vmem:[%s0 + $0x198] sm:$0xff]
  %v60 = vld [vmem:[%s0 + $0x1a0] sm:$0xff]
  %v61 = vld [vmem:[%s0 + $0x1a8] sm:$0xff]
  %v62 = vld [vmem:[%s0 + $0x1b0] sm:$0xff]
  %v63 = vld [vmem:[%s0 + $0x1b8] sm:$0x3]
  %v64 = vld [vmem:[%s0 + $0x1c0] sm:$0xff]
  %v65 = vld [vmem:[%s0 + $0x1c8] sm:$0xff]
  %v66 = vld [vmem:[%s0 + $0x1d0] sm:$0xff]
  %v67 = vld [vmem:[%s0 + $0x1d8] sm:$0xff]
  %v68 = vld [vmem:[%s0 + $0x1e0] sm:$0xff]
  %v69 = vld [vmem:[%s0 + $0x1e8] sm:$0xff]
  %v70 = vld [vmem:[%s0 + $0x1f0] sm:$0x3]
  %v71 = vmax.f32 %v8, %v15
  %v72 = vmax.f32 %v71, %v22
  %v73 = vmax.f32 %v72, %v29
  %v74 = vmax.f32 %v73, %v36
  %v75 = vmax.f32 %v74, %v43
  %v76 = vmax.f32 %v75, %v50
  %v77 = vmax.f32 %v76, %v57
  %v78 = vmax.f32 %v77, %v64
  %v79 = vmax.f32 %v9, %v16
  %v80 = vmax.f32 %v79, %v23
  %v81 = vmax.f32 %v80, %v30
  %v82 = vmax.f32 %v81, %v37
  %v83 = vmax.f32 %v82, %v44
  %v84 = vmax.f32 %v83, %v51
  %v85 = vmax.f32 %v84, %v58
  %v86 = vmax.f32 %v85, %v65
  %v87 = vmax.f32 %v10, %v17
  %v88 = vmax.f32 %v87, %v24
  %v89 = vmax.f32 %v88, %v31
  %v90 = vmax.f32 %v89, %v38
  %v91 = vmax.f32 %v90, %v45
  %v92 = vmax.f32 %v91, %v52
  %v93 = vmax.f32 %v92, %v59
  %v94 = vmax.f32 %v93, %v66
  %v95 = vmax.f32 %v11, %v18
  %v96 = vmax.f32 %v95, %v25
  %v97 = vmax.f32 %v96, %v32
  %v98 = vmax.f32 %v97, %v39
  %v99 = vmax.f32 %v98, %v46
  %v100 = vmax.f32 %v99, %v53
  %v101 = vmax.f32 %v100, %v60
  %v102 = vmax.f32 %v101, %v67
  %v103 = vmax.f32 %v12, %v19
  %v104 = vmax.f32 %v103, %v26
  %v105 = vmax.f32 %v104, %v33
  %v106 = vmax.f32 %v105, %v40
  %v107 = vmax.f32 %v106, %v47
  %v108 = vmax.f32 %v107, %v54
  %v109 = vmax.f32 %v108, %v61
  %v110 = vmax.f32 %v109, %v68
  %v111 = vmax.f32 %v13, %v20
  %v112 = vmax.f32 %v111, %v27
  %v113 = vmax.f32 %v112, %v34
  %v114 = vmax.f32 %v113, %v41
  %v115 = vmax.f32 %v114, %v48
  %v116 = vmax.f32 %v115, %v55
  %v117 = vmax.f32 %v116, %v62
  %v118 = vmax.f32 %v117, %v69
  %vm119 = vcmask 1041408
  %v120 = vsel %vm119, %v14, -inf
  %v121 = vsel %vm119, %v21, -inf
  %v122 = vmax.f32 %v120, %v121
  %v123 = vsel %vm119, %v28, -inf
  %v124 = vmax.f32 %v122, %v123
  %v125 = vsel %vm119, %v35, -inf
  %v126 = vmax.f32 %v124, %v125
  %v127 = vsel %vm119, %v42, -inf
  %v128 = vmax.f32 %v126, %v127
  %v129 = vsel %vm119, %v49, -inf
  %v130 = vmax.f32 %v128, %v129
  %v131 = vsel %vm119, %v56, -inf
  %v132 = vmax.f32 %v130, %v131
  %v133 = vsel %vm119, %v63, -inf
  %v134 = vmax.f32 %v132, %v133
  %v135 = vsel %vm119, %v70, -inf
  %v136 = vmax.f32 %v134, %v135
  %137 = vst [vmem:[%s1] sm:$0xff] %v78
  %138 = vst [vmem:[%s1 + $0x8] sm:$0xff] %v86
  %139 = vst [vmem:[%s1 + $0x10] sm:$0xff] %v94
  %140 = vst [vmem:[%s1 + $0x18] sm:$0xff] %v102
  %141 = vst [vmem:[%s1 + $0x20] sm:$0xff] %v110
  %142 = vst [vmem:[%s1 + $0x28] sm:$0xff] %v118
  %143 = vst [vmem:[%s1 + $0x30] sm:$0x3] %v136
  // Predicated region
  $region6: #{alexnet_forward_pallas.8} parent=0 // pred_check
    _
  $region7: #{alexnet_forward_pallas.8} parent=0 // pred_check_branch
    %145 = sbr.rel (0) target = $region9
  $region8: #{alexnet_forward_pallas.8} parent=0 // pred_region
    _
  $region9: #{alexnet_forward_pallas.8} parent=0 // pred_fallthru
    _
  // Predicated region
  $region10: #{alexnet_forward_pallas.8} parent=0 // pred_check
    _
  $region11: #{alexnet_forward_pallas.8} parent=0 // pred_check_branch
    %147 = sbr.rel (0) target = $region13
  $region12: #{alexnet_forward_pallas.8} parent=0 // pred_region
    _
  $region13: #{alexnet_forward_pallas.8} parent=0 // pred_fallthru
    _

// kernel: alexnet_forward_pallas.9
$region0: #{alexnet_forward_pallas.9}
  #allocation0 [shape = 'u32[]', space=smem, size = 0x4, offset = 0x4, fixed_abs, tag = 'smem constant byte address 0x4 - core index']
  #allocation1 [shape = 'u32[144,128]{1,0:T(1,128)}', space=vmem, size = 0x12000, scoped, tag = 'internal scratch']
  %s0 = inlined_call_operand.vmem [shape: f32[8,3200], index: 0, kind: input, shape index: {}]
  %s1 = inlined_call_operand.vmem [shape: f32[3200,39], index: 1, kind: input, shape index: {}]
  %s2 = inlined_call_operand.vmem [shape: f32[1,39], index: 2, kind: input, shape index: {}]
  %s3 = inlined_call_operand.vmem [shape: f32[39,10], index: 3, kind: input, shape index: {}]
  %s4 = inlined_call_operand.vmem [shape: f32[1,10], index: 4, kind: input, shape index: {}]
  %s5 = inlined_call_operand.vmem [shape: f32[10,5], index: 5, kind: input, shape index: {}]
  %s6 = inlined_call_operand.vmem [shape: f32[1,5], index: 6, kind: input, shape index: {}]
  %s7 = inlined_call_operand.vmem [shape: f32[8,5], index: 7, kind: output, shape index: {}]
  %s8 = sld [smem:[#allocation0]]
  $region38: #{alexnet_forward_pallas.9} parent=0
    _
  %s10 = ssub.s32 1, %s8
  %s11 = scalar_select 0, %s10, %s8
  // Predicated region
  $region2: #{alexnet_forward_pallas.9} parent=0 // pred_check
    _
  $region3: #{alexnet_forward_pallas.9} parent=0 // pred_check_branch
    %13 = sbr.rel (0) target = $region5
  $region4: #{alexnet_forward_pallas.9} parent=0 // pred_region
    _
  $region5: #{alexnet_forward_pallas.9} parent=0 // pred_fallthru
    _
  // Predicated region
  $region6: #{alexnet_forward_pallas.9} parent=0 // pred_check
    _
  $region7: #{alexnet_forward_pallas.9} parent=0 // pred_check_branch
    %15 = sbr.rel (0) target = $region9
  $region8: #{alexnet_forward_pallas.9} parent=0 // pred_region
    _
  $region9: #{alexnet_forward_pallas.9} parent=0 // pred_fallthru
    _
  // Predicated region
  $region10: #{alexnet_forward_pallas.9} parent=0 // pred_check
    _
  $region11: #{alexnet_forward_pallas.9} parent=0 // pred_check_branch
    %17 = sbr.rel (0) target = $region13
  $region12: #{alexnet_forward_pallas.9} parent=0 // pred_region
    _
  $region13: #{alexnet_forward_pallas.9} parent=0 // pred_fallthru
    _
  // Predicated region
  $region14: #{alexnet_forward_pallas.9} parent=0 // pred_check
    _
  $region15: #{alexnet_forward_pallas.9} parent=0 // pred_check_branch
    %19 = sbr.rel (0) target = $region17
  $region16: #{alexnet_forward_pallas.9} parent=0 // pred_region
    _
  $region17: #{alexnet_forward_pallas.9} parent=0 // pred_fallthru
    _
  // Predicated region
  $region18: #{alexnet_forward_pallas.9} parent=0 // pred_check
    _
  $region19: #{alexnet_forward_pallas.9} parent=0 // pred_check_branch
    %21 = sbr.rel (0) target = $region21
  $region20: #{alexnet_forward_pallas.9} parent=0 // pred_region
    _
  $region21: #{alexnet_forward_pallas.9} parent=0 // pred_fallthru
    _
  // Predicated region
  $region22: #{alexnet_forward_pallas.9} parent=0 // pred_check
    _
  $region23: #{alexnet_forward_pallas.9} parent=0 // pred_check_branch
    %23 = sbr.rel (0) target = $region25
  $region24: #{alexnet_forward_pallas.9} parent=0 // pred_region
    _
  $region25: #{alexnet_forward_pallas.9} parent=0 // pred_fallthru
    _
  // Predicated region
  $region26: #{alexnet_forward_pallas.9} parent=0 // pred_check
    _
  $region27: #{alexnet_forward_pallas.9} parent=0 // pred_check_branch
    %25 = sbr.rel (0) target = $region29
  $region28: #{alexnet_forward_pallas.9} parent=0 // pred_region
    _
  $region29: #{alexnet_forward_pallas.9} parent=0 // pred_fallthru
    _
  %v26 = vld [vmem:[%s0] sm:$0xff]
  %v27 = vld [vmem:[%s0 + $0x8] sm:$0xff]
  %v28 = vld [vmem:[%s0 + $0x10] sm:$0xff]
  %v29 = vld [vmem:[%s0 + $0x18] sm:$0xff]
  %v30 = vld [vmem:[%s0 + $0x20] sm:$0xff]
  %v31 = vld [vmem:[%s0 + $0x28] sm:$0xff]
  %v32 = vld [vmem:[%s0 + $0x30] sm:$0xff]
  %v33 = vld [vmem:[%s0 + $0x38] sm:$0xff]
  %v34 = vld [vmem:[%s0 + $0x40] sm:$0xff]
  %v35 = vld [vmem:[%s0 + $0x48] sm:$0xff]
  %v36 = vld [vmem:[%s0 + $0x50] sm:$0xff]
  %v37 = vld [vmem:[%s0 + $0x58] sm:$0xff]
  %v38 = vld [vmem:[%s0 + $0x60] sm:$0xff]
  %v39 = vld [vmem:[%s0 + $0x68] sm:$0xff]
  %v40 = vld [vmem:[%s0 + $0x70] sm:$0xff]
  %v41 = vld [vmem:[%s0 + $0x78] sm:$0xff]
  %v42 = vld [vmem:[%s0 + $0x80] sm:$0xff]
  %v43 = vld [vmem:[%s0 + $0x88] sm:$0xff]
  %v44 = vld [vmem:[%s0 + $0x90] sm:$0xff]
  %v45 = vld [vmem:[%s0 + $0x98] sm:$0xff]
  %v46 = vld [vmem:[%s0 + $0xa0] sm:$0xff]
  %v47 = vld [vmem:[%s0 + $0xa8] sm:$0xff]
  %v48 = vld [vmem:[%s0 + $0xb0] sm:$0xff]
  %v49 = vld [vmem:[%s0 + $0xb8] sm:$0xff]
  %v50 = vld [vmem:[%s0 + $0xc0] sm:$0xff]
  %v51 = vld [vmem:[%s1] sm:$0xff]
  %v52 = vld [vmem:[%s1 + $0x8] sm:$0xff]
  %v53 = vld [vmem:[%s1 + $0x10] sm:$0xff]
  %v54 = vld [vmem:[%s1 + $0x18] sm:$0xff]
  %v55 = vld [vmem:[%s1 + $0x20] sm:$0xff]
  %v56 = vld [vmem:[%s1 + $0x28] sm:$0xff]
  %v57 = vld [vmem:[%s1 + $0x30] sm:$0xff]
  %v58 = vld [vmem:[%s1 + $0x38] sm:$0xff]
  %v59 = vld [vmem:[%s1 + $0x40] sm:$0xff]
  %v60 = vld [vmem:[%s1 + $0x48] sm:$0xff]
  %v61 = vld [vmem:[%s1 + $0x50] sm:$0xff]
  %v62 = vld [vmem:[%s1 + $0x58] sm:$0xff]
  %v63 = vld [vmem:[%s1 + $0x60] sm:$0xff]
  %v64 = vld [vmem:[%s1 + $0x68] sm:$0xff]
  %v65 = vld [vmem:[%s1 + $0x70] sm:$0xff]
  %v66 = vld [vmem:[%s1 + $0x78] sm:$0xff]
  %v67 = vld [vmem:[%s1 + $0x80] sm:$0xff]
  %v68 = vld [vmem:[%s1 + $0x88] sm:$0xff]
  %v69 = vld [vmem:[%s1 + $0x90] sm:$0xff]
  %v70 = vld [vmem:[%s1 + $0x98] sm:$0xff]
  %v71 = vld [vmem:[%s1 + $0xa0] sm:$0xff]
  %v72 = vld [vmem:[%s1 + $0xa8] sm:$0xff]
  %v73 = vld [vmem:[%s1 + $0xb0] sm:$0xff]
  %v74 = vld [vmem:[%s1 + $0xb8] sm:$0xff]
  %v75 = vld [vmem:[%s1 + $0xc0] sm:$0xff]
  %v76 = vld [vmem:[%s1 + $0xc8] sm:$0xff]
  %v77 = vld [vmem:[%s1 + $0xd0] sm:$0xff]
  %v78 = vld [vmem:[%s1 + $0xd8] sm:$0xff]
  %v79 = vld [vmem:[%s1 + $0xe0] sm:$0xff]
  %v80 = vld [vmem:[%s1 + $0xe8] sm:$0xff]
  %v81 = vld [vmem:[%s1 + $0xf0] sm:$0xff]
  %v82 = vld [vmem:[%s1 + $0xf8] sm:$0xff]
  %v83 = vld [vmem:[%s1 + $0x100] sm:$0xff]
  %v84 = vld [vmem:[%s1 + $0x108] sm:$0xff]
  %v85 = vld [vmem:[%s1 + $0x110] sm:$0xff]
  %v86 = vld [vmem:[%s1 + $0x118] sm:$0xff]
  %v87 = vld [vmem:[%s1 + $0x120] sm:$0xff]
  %v88 = vld [vmem:[%s1 + $0x128] sm:$0xff]
  %v89 = vld [vmem:[%s1 + $0x130] sm:$0xff]
  %v90 = vld [vmem:[%s1 + $0x138] sm:$0xff]
  %v91 = vld [vmem:[%s1 + $0x140] sm:$0xff]
  %v92 = vld [vmem:[%s1 + $0x148] sm:$0xff]
  %v93 = vld [vmem:[%s1 + $0x150] sm:$0xff]
  %v94 = vld [vmem:[%s1 + $0x158] sm:$0xff]
  %v95 = vld [vmem:[%s1 + $0x160] sm:$0xff]
  %v96 = vld [vmem:[%s1 + $0x168] sm:$0xff]
  %v97 = vld [vmem:[%s1 + $0x170] sm:$0xff]
  %v98 = vld [vmem:[%s1 + $0x178] sm:$0xff]
  %v99 = vld [vmem:[%s1 + $0x180] sm:$0xff]
  %v100 = vld [vmem:[%s1 + $0x188] sm:$0xff]
  %v101 = vld [vmem:[%s1 + $0x190] sm:$0xff]
  %v102 = vld [vmem:[%s1 + $0x198] sm:$0xff]
  %v103 = vld [vmem:[%s1 + $0x1a0] sm:$0xff]
  %v104 = vld [vmem:[%s1 + $0x1a8] sm:$0xff]
  %v105 = vld [vmem:[%s1 + $0x1b0] sm:$0xff]
  %v106 = vld [vmem:[%s1 + $0x1b8] sm:$0xff]
  %v107 = vld [vmem:[%s1 + $0x1c0] sm:$0xff]
  %v108 = vld [vmem:[%s1 + $0x1c8] sm:$0xff]
  %v109 = vld [vmem:[%s1 + $0x1d0] sm:$0xff]
  %v110 = vld [vmem:[%s1 + $0x1d8] sm:$0xff]
  %v111 = vld [vmem:[%s1 + $0x1e0] sm:$0xff]
  %v112 = vld [vmem:[%s1 + $0x1e8] sm:$0xff]
  %v113 = vld [vmem:[%s1 + $0x1f0] sm:$0xff]
  %v114 = vld [vmem:[%s1 + $0x1f8] sm:$0xff]
  %v115 = vld [vmem:[%s1 + $0x200] sm:$0xff]
  %v116 = vld [vmem:[%s1 + $0x208] sm:$0xff]
  %v117 = vld [vmem:[%s1 + $0x210] sm:$0xff]
  %v118 = vld [vmem:[%s1 + $0x218] sm:$0xff]
  %v119 = vld [vmem:[%s1 + $0x220] sm:$0xff]
  %v120 = vld [vmem:[%s1 + $0x228] sm:$0xff]
  %v121 = vld [vmem:[%s1 + $0x230] sm:$0xff]
  %v122 = vld [vmem:[%s1 + $0x238] sm:$0xff]
  %v123 = vld [vmem:[%s1 + $0x240] sm:$0xff]
  %v124 = vld [vmem:[%s1 + $0x248] sm:$0xff]
  %v125 = vld [vmem:[%s1 + $0x250] sm:$0xff]
  %v126 = vld [vmem:[%s1 + $0x258] sm:$0xff]
  %v127 = vld [vmem:[%s1 + $0x260] sm:$0xff]
  %v128 = vld [vmem:[%s1 + $0x268] sm:$0xff]
  %v129 = vld [vmem:[%s1 + $0x270] sm:$0xff]
  %v130 = vld [vmem:[%s1 + $0x278] sm:$0xff]
  %v131 = vld [vmem:[%s1 + $0x280] sm:$0xff]
  %v132 = vld [vmem:[%s1 + $0x288] sm:$0xff]
  %v133 = vld [vmem:[%s1 + $0x290] sm:$0xff]
  %v134 = vld [vmem:[%s1 + $0x298] sm:$0xff]
  %v135 = vld [vmem:[%s1 + $0x2a0] sm:$0xff]
  %v136 = vld [vmem:[%s1 + $0x2a8] sm:$0xff]
  %v137 = vld [vmem:[%s1 + $0x2b0] sm:$0xff]
  %v138 = vld [vmem:[%s1 + $0x2b8] sm:$0xff]
  %v139 = vld [vmem:[%s1 + $0x2c0] sm:$0xff]
  %v140 = vld [vmem:[%s1 + $0x2c8] sm:$0xff]
  %v141 = vld [vmem:[%s1 + $0x2d0] sm:$0xff]
  %v142 = vld [vmem:[%s1 + $0x2d8] sm:$0xff]
  %v143 = vld [vmem:[%s1 + $0x2e0] sm:$0xff]
  %v144 = vld [vmem:[%s1 + $0x2e8] sm:$0xff]
  %v145 = vld [vmem:[%s1 + $0x2f0] sm:$0xff]
  %v146 = vld [vmem:[%s1 + $0x2f8] sm:$0xff]
  %v147 = vld [vmem:[%s1 + $0x300] sm:$0xff]
  %v148 = vld [vmem:[%s1 + $0x308] sm:$0xff]
  %v149 = vld [vmem:[%s1 + $0x310] sm:$0xff]
  %v150 = vld [vmem:[%s1 + $0x318] sm:$0xff]
  %v151 = vld [vmem:[%s1 + $0x320] sm:$0xff]
  %v152 = vld [vmem:[%s1 + $0x328] sm:$0xff]
  %v153 = vld [vmem:[%s1 + $0x330] sm:$0xff]
  %v154 = vld [vmem:[%s1 + $0x338] sm:$0xff]
  %v155 = vld [vmem:[%s1 + $0x340] sm:$0xff]
  %v156 = vld [vmem:[%s1 + $0x348] sm:$0xff]
  %v157 = vld [vmem:[%s1 + $0x350] sm:$0xff]
  %v158 = vld [vmem:[%s1 + $0x358] sm:$0xff]
  %v159 = vld [vmem:[%s1 + $0x360] sm:$0xff]
  %v160 = vld [vmem:[%s1 + $0x368] sm:$0xff]
  %v161 = vld [vmem:[%s1 + $0x370] sm:$0xff]
  %v162 = vld [vmem:[%s1 + $0x378] sm:$0xff]
  %v163 = vld [vmem:[%s1 + $0x380] sm:$0xff]
  %v164 = vld [vmem:[%s1 + $0x388] sm:$0xff]
  %v165 = vld [vmem:[%s1 + $0x390] sm:$0xff]
  %v166 = vld [vmem:[%s1 + $0x398] sm:$0xff]
  %v167 = vld [vmem:[%s1 + $0x3a0] sm:$0xff]
  %v168 = vld [vmem:[%s1 + $0x3a8] sm:$0xff]
  %v169 = vld [vmem:[%s1 + $0x3b0] sm:$0xff]
  %v170 = vld [vmem:[%s1 + $0x3b8] sm:$0xff]
  %v171 = vld [vmem:[%s1 + $0x3c0] sm:$0xff]
  %v172 = vld [vmem:[%s1 + $0x3c8] sm:$0xff]
  %v173 = vld [vmem:[%s1 + $0x3d0] sm:$0xff]
  %v174 = vld [vmem:[%s1 + $0x3d8] sm:$0xff]
  %v175 = vld [vmem:[%s1 + $0x3e0] sm:$0xff]
  %v176 = vld [vmem:[%s1 + $0x3e8] sm:$0xff]
  %v177 = vld [vmem:[%s1 + $0x3f0] sm:$0xff]
  %v178 = vld [vmem:[%s1 + $0x3f8] sm:$0xff]
  %v179 = vld [vmem:[%s1 + $0x400] sm:$0xff]
  %v180 = vld [vmem:[%s1 + $0x408] sm:$0xff]
  %v181 = vld [vmem:[%s1 + $0x410] sm:$0xff]
  %v182 = vld [vmem:[%s1 + $0x418] sm:$0xff]
  %v183 = vld [vmem:[%s1 + $0x420] sm:$0xff]
  %v184 = vld [vmem:[%s1 + $0x428] sm:$0xff]
  %v185 = vld [vmem:[%s1 + $0x430] sm:$0xff]
  %v186 = vld [vmem:[%s1 + $0x438] sm:$0xff]
  %v187 = vld [vmem:[%s1 + $0x440] sm:$0xff]
  %v188 = vld [vmem:[%s1 + $0x448] sm:$0xff]
  %v189 = vld [vmem:[%s1 + $0x450] sm:$0xff]
  %v190 = vld [vmem:[%s1 + $0x458] sm:$0xff]
  %v191 = vld [vmem:[%s1 + $0x460] sm:$0xff]
  %v192 = vld [vmem:[%s1 + $0x468] sm:$0xff]
  %v193 = vld [vmem:[%s1 + $0x470] sm:$0xff]
  %v194 = vld [vmem:[%s1 + $0x478] sm:$0xff]
  %v195 = vld [vmem:[%s1 + $0x480] sm:$0xff]
  %v196 = vld [vmem:[%s1 + $0x488] sm:$0xff]
  %v197 = vld [vmem:[%s1 + $0x490] sm:$0xff]
  %v198 = vld [vmem:[%s1 + $0x498] sm:$0xff]
  %v199 = vld [vmem:[%s1 + $0x4a0] sm:$0xff]
  %v200 = vld [vmem:[%s1 + $0x4a8] sm:$0xff]
  %v201 = vld [vmem:[%s1 + $0x4b0] sm:$0xff]
  %v202 = vld [vmem:[%s1 + $0x4b8] sm:$0xff]
  %v203 = vld [vmem:[%s1 + $0x4c0] sm:$0xff]
  %v204 = vld [vmem:[%s1 + $0x4c8] sm:$0xff]
  %v205 = vld [vmem:[%s1 + $0x4d0] sm:$0xff]
  %v206 = vld [vmem:[%s1 + $0x4d8] sm:$0xff]
  %v207 = vld [vmem:[%s1 + $0x4e0] sm:$0xff]
  %v208 = vld [vmem:[%s1 + $0x4e8] sm:$0xff]
  %v209 = vld [vmem:[%s1 + $0x4f0] sm:$0xff]
  %v210 = vld [vmem:[%s1 + $0x4f8] sm:$0xff]
  %v211 = vld [vmem:[%s1 + $0x500] sm:$0xff]
  %v212 = vld [vmem:[%s1 + $0x508] sm:$0xff]
  %v213 = vld [vmem:[%s1 + $0x510] sm:$0xff]
  %v214 = vld [vmem:[%s1 + $0x518] sm:$0xff]
  %v215 = vld [vmem:[%s1 + $0x520] sm:$0xff]
  %v216 = vld [vmem:[%s1 + $0x528] sm:$0xff]
  %v217 = vld [vmem:[%s1 + $0x530] sm:$0xff]
  %v218 = vld [vmem:[%s1 + $0x538] sm:$0xff]
  %v219 = vld [vmem:[%s1 + $0x540] sm:$0xff]
  %v220 = vld [vmem:[%s1 + $0x548] sm:$0xff]
  %v221 = vld [vmem:[%s1 + $0x550] sm:$0xff]
  %v222 = vld [vmem:[%s1 + $0x558] sm:$0xff]
  %v223 = vld [vmem:[%s1 + $0x560] sm:$0xff]
  %v224 = vld [vmem:[%s1 + $0x568] sm:$0xff]
  %v225 = vld [vmem:[%s1 + $0x570] sm:$0xff]
  %v226 = vld [vmem:[%s1 + $0x578] sm:$0xff]
  %v227 = vld [vmem:[%s1 + $0x580] sm:$0xff]
  %v228 = vld [vmem:[%s1 + $0x588] sm:$0xff]
  %v229 = vld [vmem:[%s1 + $0x590] sm:$0xff]
  %v230 = vld [vmem:[%s1 + $0x598] sm:$0xff]
  %v231 = vld [vmem:[%s1 + $0x5a0] sm:$0xff]
  %v232 = vld [vmem:[%s1 + $0x5a8] sm:$0xff]
  %v233 = vld [vmem:[%s1 + $0x5b0] sm:$0xff]
  %v234 = vld [vmem:[%s1 + $0x5b8] sm:$0xff]
  %v235 = vld [vmem:[%s1 + $0x5c0] sm:$0xff]
  %v236 = vld [vmem:[%s1 + $0x5c8] sm:$0xff]
  %v237 = vld [vmem:[%s1 + $0x5d0] sm:$0xff]
  %v238 = vld [vmem:[%s1 + $0x5d8] sm:$0xff]
  %v239 = vld [vmem:[%s1 + $0x5e0] sm:$0xff]
  %v240 = vld [vmem:[%s1 + $0x5e8] sm:$0xff]
  %v241 = vld [vmem:[%s1 + $0x5f0] sm:$0xff]
  %v242 = vld [vmem:[%s1 + $0x5f8] sm:$0xff]
  %v243 = vld [vmem:[%s1 + $0x600] sm:$0xff]
  %v244 = vld [vmem:[%s1 + $0x608] sm:$0xff]
  %v245 = vld [vmem:[%s1 + $0x610] sm:$0xff]
  %v246 = vld [vmem:[%s1 + $0x618] sm:$0xff]
  %v247 = vld [vmem:[%s1 + $0x620] sm:$0xff]
  %v248 = vld [vmem:[%s1 + $0x628] sm:$0xff]
  %v249 = vld [vmem:[%s1 + $0x630] sm:$0xff]
  %v250 = vld [vmem:[%s1 + $0x638] sm:$0xff]
  %v251 = vld [vmem:[%s1 + $0x640] sm:$0xff]
  %v252 = vld [vmem:[%s1 + $0x648] sm:$0xff]
  %v253 = vld [vmem:[%s1 + $0x650] sm:$0xff]
  %v254 = vld [vmem:[%s1 + $0x658] sm:$0xff]
  %v255 = vld [vmem:[%s1 + $0x660] sm:$0xff]
  %v256 = vld [vmem:[%s1 + $0x668] sm:$0xff]
  %v257 = vld [vmem:[%s1 + $0x670] sm:$0xff]
  %v258 = vld [vmem:[%s1 + $0x678] sm:$0xff]
  %v259 = vld [vmem:[%s1 + $0x680] sm:$0xff]
  %v260 = vld [vmem:[%s1 + $0x688] sm:$0xff]
  %v261 = vld [vmem:[%s1 + $0x690] sm:$0xff]
  %v262 = vld [vmem:[%s1 + $0x698] sm:$0xff]
  %v263 = vld [vmem:[%s1 + $0x6a0] sm:$0xff]
  %v264 = vld [vmem:[%s1 + $0x6a8] sm:$0xff]
  %v265 = vld [vmem:[%s1 + $0x6b0] sm:$0xff]
  %v266 = vld [vmem:[%s1 + $0x6b8] sm:$0xff]
  %v267 = vld [vmem:[%s1 + $0x6c0] sm:$0xff]
  %v268 = vld [vmem:[%s1 + $0x6c8] sm:$0xff]
  %v269 = vld [vmem:[%s1 + $0x6d0] sm:$0xff]
  %v270 = vld [vmem:[%s1 + $0x6d8] sm:$0xff]
  %v271 = vld [vmem:[%s1 + $0x6e0] sm:$0xff]
  %v272 = vld [vmem:[%s1 + $0x6e8] sm:$0xff]
  %v273 = vld [vmem:[%s1 + $0x6f0] sm:$0xff]
  %v274 = vld [vmem:[%s1 + $0x6f8] sm:$0xff]
  %v275 = vld [vmem:[%s1 + $0x700] sm:$0xff]
  %v276 = vld [vmem:[%s1 + $0x708] sm:$0xff]
  %v277 = vld [vmem:[%s1 + $0x710] sm:$0xff]
  %v278 = vld [vmem:[%s1 + $0x718] sm:$0xff]
  %v279 = vld [vmem:[%s1 + $0x720] sm:$0xff]
  %v280 = vld [vmem:[%s1 + $0x728] sm:$0xff]
  %v281 = vld [vmem:[%s1 + $0x730] sm:$0xff]
  %v282 = vld [vmem:[%s1 + $0x738] sm:$0xff]
  %v283 = vld [vmem:[%s1 + $0x740] sm:$0xff]
  %v284 = vld [vmem:[%s1 + $0x748] sm:$0xff]
  %v285 = vld [vmem:[%s1 + $0x750] sm:$0xff]
  %v286 = vld [vmem:[%s1 + $0x758] sm:$0xff]
  %v287 = vld [vmem:[%s1 + $0x760] sm:$0xff]
  %v288 = vld [vmem:[%s1 + $0x768] sm:$0xff]
  %v289 = vld [vmem:[%s1 + $0x770] sm:$0xff]
  %v290 = vld [vmem:[%s1 + $0x778] sm:$0xff]
  %v291 = vld [vmem:[%s1 + $0x780] sm:$0xff]
  %v292 = vld [vmem:[%s1 + $0x788] sm:$0xff]
  %v293 = vld [vmem:[%s1 + $0x790] sm:$0xff]
  %v294 = vld [vmem:[%s1 + $0x798] sm:$0xff]
  %v295 = vld [vmem:[%s1 + $0x7a0] sm:$0xff]
  %v296 = vld [vmem:[%s1 + $0x7a8] sm:$0xff]
  %v297 = vld [vmem:[%s1 + $0x7b0] sm:$0xff]
  %v298 = vld [vmem:[%s1 + $0x7b8] sm:$0xff]
  %v299 = vld [vmem:[%s1 + $0x7c0] sm:$0xff]
  %v300 = vld [vmem:[%s1 + $0x7c8] sm:$0xff]
  %v301 = vld [vmem:[%s1 + $0x7d0] sm:$0xff]
  %v302 = vld [vmem:[%s1 + $0x7d8] sm:$0xff]
  %v303 = vld [vmem:[%s1 + $0x7e0] sm:$0xff]
  %v304 = vld [vmem:[%s1 + $0x7e8] sm:$0xff]
  %v305 = vld [vmem:[%s1 + $0x7f0] sm:$0xff]
  %v306 = vld [vmem:[%s1 + $0x7f8] sm:$0xff]
  %v307 = vld [vmem:[%s1 + $0x800] sm:$0xff]
  %v308 = vld [vmem:[%s1 + $0x808] sm:$0xff]
  %v309 = vld [vmem:[%s1 + $0x810] sm:$0xff]
  %v310 = vld [vmem:[%s1 + $0x818] sm:$0xff]
  %v311 = vld [vmem:[%s1 + $0x820] sm:$0xff]
  %v312 = vld [vmem:[%s1 + $0x828] sm:$0xff]
  %v313 = vld [vmem:[%s1 + $0x830] sm:$0xff]
  %v314 = vld [vmem:[%s1 + $0x838] sm:$0xff]
  %v315 = vld [vmem:[%s1 + $0x840] sm:$0xff]
  %v316 = vld [vmem:[%s1 + $0x848] sm:$0xff]
  %v317 = vld [vmem:[%s1 + $0x850] sm:$0xff]
  %v318 = vld [vmem:[%s1 + $0x858] sm:$0xff]
  %v319 = vld [vmem:[%s1 + $0x860] sm:$0xff]
  %v320 = vld [vmem:[%s1 + $0x868] sm:$0xff]
  %v321 = vld [vmem:[%s1 + $0x870] sm:$0xff]
  %v322 = vld [vmem:[%s1 + $0x878] sm:$0xff]
  %v323 = vld [vmem:[%s1 + $0x880] sm:$0xff]
  %v324 = vld [vmem:[%s1 + $0x888] sm:$0xff]
  %v325 = vld [vmem:[%s1 + $0x890] sm:$0xff]
  %v326 = vld [vmem:[%s1 + $0x898] sm:$0xff]
  %v327 = vld [vmem:[%s1 + $0x8a0] sm:$0xff]
  %v328 = vld [vmem:[%s1 + $0x8a8] sm:$0xff]
  %v329 = vld [vmem:[%s1 + $0x8b0] sm:$0xff]
  %v330 = vld [vmem:[%s1 + $0x8b8] sm:$0xff]
  %v331 = vld [vmem:[%s1 + $0x8c0] sm:$0xff]
  %v332 = vld [vmem:[%s1 + $0x8c8] sm:$0xff]
  %v333 = vld [vmem:[%s1 + $0x8d0] sm:$0xff]
  %v334 = vld [vmem:[%s1 + $0x8d8] sm:$0xff]
  %v335 = vld [vmem:[%s1 + $0x8e0] sm:$0xff]
  %v336 = vld [vmem:[%s1 + $0x8e8] sm:$0xff]
  %v337 = vld [vmem:[%s1 + $0x8f0] sm:$0xff]
  %v338 = vld [vmem:[%s1 + $0x8f8] sm:$0xff]
  %v339 = vld [vmem:[%s1 + $0x900] sm:$0xff]
  %v340 = vld [vmem:[%s1 + $0x908] sm:$0xff]
  %v341 = vld [vmem:[%s1 + $0x910] sm:$0xff]
  %v342 = vld [vmem:[%s1 + $0x918] sm:$0xff]
  %v343 = vld [vmem:[%s1 + $0x920] sm:$0xff]
  %v344 = vld [vmem:[%s1 + $0x928] sm:$0xff]
  %v345 = vld [vmem:[%s1 + $0x930] sm:$0xff]
  %v346 = vld [vmem:[%s1 + $0x938] sm:$0xff]
  %v347 = vld [vmem:[%s1 + $0x940] sm:$0xff]
  %v348 = vld [vmem:[%s1 + $0x948] sm:$0xff]
  %v349 = vld [vmem:[%s1 + $0x950] sm:$0xff]
  %v350 = vld [vmem:[%s1 + $0x958] sm:$0xff]
  %v351 = vld [vmem:[%s1 + $0x960] sm:$0xff]
  %v352 = vld [vmem:[%s1 + $0x968] sm:$0xff]
  %v353 = vld [vmem:[%s1 + $0x970] sm:$0xff]
  %v354 = vld [vmem:[%s1 + $0x978] sm:$0xff]
  %v355 = vld [vmem:[%s1 + $0x980] sm:$0xff]
  %v356 = vld [vmem:[%s1 + $0x988] sm:$0xff]
  %v357 = vld [vmem:[%s1 + $0x990] sm:$0xff]
  %v358 = vld [vmem:[%s1 + $0x998] sm:$0xff]
  %v359 = vld [vmem:[%s1 + $0x9a0] sm:$0xff]
  %v360 = vld [vmem:[%s1 + $0x9a8] sm:$0xff]
  %v361 = vld [vmem:[%s1 + $0x9b0] sm:$0xff]
  %v362 = vld [vmem:[%s1 + $0x9b8] sm:$0xff]
  %v363 = vld [vmem:[%s1 + $0x9c0] sm:$0xff]
  %v364 = vld [vmem:[%s1 + $0x9c8] sm:$0xff]
  %v365 = vld [vmem:[%s1 + $0x9d0] sm:$0xff]
  %v366 = vld [vmem:[%s1 + $0x9d8] sm:$0xff]
  %v367 = vld [vmem:[%s1 + $0x9e0] sm:$0xff]
  %v368 = vld [vmem:[%s1 + $0x9e8] sm:$0xff]
  %v369 = vld [vmem:[%s1 + $0x9f0] sm:$0xff]
  %v370 = vld [vmem:[%s1 + $0x9f8] sm:$0xff]
  %v371 = vld [vmem:[%s1 + $0xa00] sm:$0xff]
  %v372 = vld [vmem:[%s1 + $0xa08] sm:$0xff]
  %v373 = vld [vmem:[%s1 + $0xa10] sm:$0xff]
  %v374 = vld [vmem:[%s1 + $0xa18] sm:$0xff]
  %v375 = vld [vmem:[%s1 + $0xa20] sm:$0xff]
  %v376 = vld [vmem:[%s1 + $0xa28] sm:$0xff]
  %v377 = vld [vmem:[%s1 + $0xa30] sm:$0xff]
  %v378 = vld [vmem:[%s1 + $0xa38] sm:$0xff]
  %v379 = vld [vmem:[%s1 + $0xa40] sm:$0xff]
  %v380 = vld [vmem:[%s1 + $0xa48] sm:$0xff]
  %v381 = vld [vmem:[%s1 + $0xa50] sm:$0xff]
  %v382 = vld [vmem:[%s1 + $0xa58] sm:$0xff]
  %v383 = vld [vmem:[%s1 + $0xa60] sm:$0xff]
  %v384 = vld [vmem:[%s1 + $0xa68] sm:$0xff]
  %v385 = vld [vmem:[%s1 + $0xa70] sm:$0xff]
  %v386 = vld [vmem:[%s1 + $0xa78] sm:$0xff]
  %v387 = vld [vmem:[%s1 + $0xa80] sm:$0xff]
  %v388 = vld [vmem:[%s1 + $0xa88] sm:$0xff]
  %v389 = vld [vmem:[%s1 + $0xa90] sm:$0xff]
  %v390 = vld [vmem:[%s1 + $0xa98] sm:$0xff]
  %v391 = vld [vmem:[%s1 + $0xaa0] sm:$0xff]
  %v392 = vld [vmem:[%s1 + $0xaa8] sm:$0xff]
  %v393 = vld [vmem:[%s1 + $0xab0] sm:$0xff]
  %v394 = vld [vmem:[%s1 + $0xab8] sm:$0xff]
  %v395 = vld [vmem:[%s1 + $0xac0] sm:$0xff]
  %v396 = vld [vmem:[%s1 + $0xac8] sm:$0xff]
  %v397 = vld [vmem:[%s1 + $0xad0] sm:$0xff]
  %v398 = vld [vmem:[%s1 + $0xad8] sm:$0xff]
  %v399 = vld [vmem:[%s1 + $0xae0] sm:$0xff]
  %v400 = vld [vmem:[%s1 + $0xae8] sm:$0xff]
  %v401 = vld [vmem:[%s1 + $0xaf0] sm:$0xff]
  %v402 = vld [vmem:[%s1 + $0xaf8] sm:$0xff]
  %v403 = vld [vmem:[%s1 + $0xb00] sm:$0xff]
  %v404 = vld [vmem:[%s1 + $0xb08] sm:$0xff]
  %v405 = vld [vmem:[%s1 + $0xb10] sm:$0xff]
  %v406 = vld [vmem:[%s1 + $0xb18] sm:$0xff]
  %v407 = vld [vmem:[%s1 + $0xb20] sm:$0xff]
  %v408 = vld [vmem:[%s1 + $0xb28] sm:$0xff]
  %v409 = vld [vmem:[%s1 + $0xb30] sm:$0xff]
  %v410 = vld [vmem:[%s1 + $0xb38] sm:$0xff]
  %v411 = vld [vmem:[%s1 + $0xb40] sm:$0xff]
  %v412 = vld [vmem:[%s1 + $0xb48] sm:$0xff]
  %v413 = vld [vmem:[%s1 + $0xb50] sm:$0xff]
  %v414 = vld [vmem:[%s1 + $0xb58] sm:$0xff]
  %v415 = vld [vmem:[%s1 + $0xb60] sm:$0xff]
  %v416 = vld [vmem:[%s1 + $0xb68] sm:$0xff]
  %v417 = vld [vmem:[%s1 + $0xb70] sm:$0xff]
  %v418 = vld [vmem:[%s1 + $0xb78] sm:$0xff]
  %v419 = vld [vmem:[%s1 + $0xb80] sm:$0xff]
  %v420 = vld [vmem:[%s1 + $0xb88] sm:$0xff]
  %v421 = vld [vmem:[%s1 + $0xb90] sm:$0xff]
  %v422 = vld [vmem:[%s1 + $0xb98] sm:$0xff]
  %v423 = vld [vmem:[%s1 + $0xba0] sm:$0xff]
  %v424 = vld [vmem:[%s1 + $0xba8] sm:$0xff]
  %v425 = vld [vmem:[%s1 + $0xbb0] sm:$0xff]
  %v426 = vld [vmem:[%s1 + $0xbb8] sm:$0xff]
  %v427 = vld [vmem:[%s1 + $0xbc0] sm:$0xff]
  %v428 = vld [vmem:[%s1 + $0xbc8] sm:$0xff]
  %v429 = vld [vmem:[%s1 + $0xbd0] sm:$0xff]
  %v430 = vld [vmem:[%s1 + $0xbd8] sm:$0xff]
  %v431 = vld [vmem:[%s1 + $0xbe0] sm:$0xff]
  %v432 = vld [vmem:[%s1 + $0xbe8] sm:$0xff]
  %v433 = vld [vmem:[%s1 + $0xbf0] sm:$0xff]
  %v434 = vld [vmem:[%s1 + $0xbf8] sm:$0xff]
  %v435 = vld [vmem:[%s1 + $0xc00] sm:$0xff]
  %v436 = vld [vmem:[%s1 + $0xc08] sm:$0xff]
  %v437 = vld [vmem:[%s1 + $0xc10] sm:$0xff]
  %v438 = vld [vmem:[%s1 + $0xc18] sm:$0xff]
  %v439 = vld [vmem:[%s1 + $0xc20] sm:$0xff]
  %v440 = vld [vmem:[%s1 + $0xc28] sm:$0xff]
  %v441 = vld [vmem:[%s1 + $0xc30] sm:$0xff]
  %v442 = vld [vmem:[%s1 + $0xc38] sm:$0xff]
  %v443 = vld [vmem:[%s1 + $0xc40] sm:$0xff]
  %v444 = vld [vmem:[%s1 + $0xc48] sm:$0xff]
  %v445 = vld [vmem:[%s1 + $0xc50] sm:$0xff]
  %v446 = vld [vmem:[%s1 + $0xc58] sm:$0xff]
  %v447 = vld [vmem:[%s1 + $0xc60] sm:$0xff]
  %v448 = vld [vmem:[%s1 + $0xc68] sm:$0xff]
  %v449 = vld [vmem:[%s1 + $0xc70] sm:$0xff]
  %v450 = vld [vmem:[%s1 + $0xc78] sm:$0xff]
  %v451 = vld [vmem:[%s2] sm:$0x1]
  %v453 = vlaneseq
  %v454 = vshrl.u32 %v453, 7
  %v455 = vsub.s32 0, %v454
  %v456 = vrot.slane %v451, %v455
  %458 = vmatprep.subr.mxu0 0.0
  %459 = vmatpush1.msra.mxu0 %v51
  %460 = vmatprep.subr.mxu0 0.0
  %461 = vmatpush1.msra.mxu0 %v52
  %462 = vmatprep.subr.mxu0 0.0
  %463 = vmatpush1.msra.mxu0 %v53
  %464 = vmatprep.subr.mxu0 0.0
  %465 = vmatpush1.msra.mxu0 %v54
  %466 = vmatprep.subr.mxu0 0.0
  %467 = vmatpush1.msra.mxu0 %v55
  %468 = vmatprep.subr.mxu0 0.0
  %469 = vmatpush1.msra.mxu0 %v56
  %470 = vmatprep.subr.mxu0 0.0
  %471 = vmatpush1.msra.mxu0 %v57
  %472 = vmatprep.subr.mxu0 0.0
  %473 = vmatpush1.msra.mxu0 %v58
  %474 = vmatprep.subr.mxu0 0.0
  %475 = vmatpush1.msra.mxu0 %v59
  %476 = vmatprep.subr.mxu0 0.0
  %477 = vmatpush1.msra.mxu0 %v60
  %478 = vmatprep.subr.mxu0 0.0
  %479 = vmatpush1.msra.mxu0 %v61
  %480 = vmatprep.subr.mxu0 0.0
  %481 = vmatpush1.msra.mxu0 %v62
  %482 = vmatprep.subr.mxu0 0.0
  %483 = vmatpush1.msra.mxu0 %v63
  %484 = vmatprep.subr.mxu0 0.0
  %485 = vmatpush1.msra.mxu0 %v64
  %486 = vmatprep.subr.mxu0 0.0
  %487 = vmatpush1.msra.mxu0 %v65
  %488 = vmatprep.subr.mxu0 0.0
  %489 = vmatpush1.msra.mxu0 %v66
  %490 = vmatprep.subr.mxu0 0.0
  %491 = vmatpush1.msra.mxu0 %v67
  %492 = vmatprep.subr.mxu0 0.0
  %493 = vmatpush1.msra.mxu0 %v68
  %494 = vmatprep.subr.mxu0 0.0
  %495 = vmatpush1.msra.mxu0 %v69
  %496 = vmatprep.subr.mxu0 0.0
  %497 = vmatpush1.msra.mxu0 %v70
  %498 = vmatprep.subr.mxu0 0.0
  %499 = vmatpush1.msra.mxu0 %v71
  %500 = vmatprep.subr.mxu0 0.0
  %501 = vmatpush1.msra.mxu0 %v72
  %502 = vmatprep.subr.mxu0 0.0
  %503 = vmatpush1.msra.mxu0 %v73
  %504 = vmatprep.subr.mxu0 0.0
  %505 = vmatpush1.msra.mxu0 %v74
  %506 = vmatprep.subr.mxu0 0.0
  %507 = vmatpush1.msra.mxu0 %v75
  %508 = vmatprep.subr.mxu0 0.0
  %509 = vmatpush1.msra.mxu0 %v76
  %510 = vmatprep.subr.mxu0 0.0
  %511 = vmatpush1.msra.mxu0 %v77
  %512 = vmatprep.subr.mxu0 0.0
  %513 = vmatpush1.msra.mxu0 %v78
  %514 = vmatprep.subr.mxu0 0.0
  %515 = vmatpush1.msra.mxu0 %v79
  %516 = vmatprep.subr.mxu0 0.0
  %517 = vmatpush1.msra.mxu0 %v80
  %518 = vmatprep.subr.mxu0 0.0
  %519 = vmatpush1.msra.mxu0 %v81
  %520 = vmatprep.subr.mxu0 0.0
  %521 = vmatpush1.msra.mxu0 %v82
  %522 = vmatprep.mubr.f32.mxu0 %v27
  %523 = vmatmul.mubr.f32.gmra.mrb[0].mxu0 %v26
  %v524 = vpop.f32.mrb[0].mxu0
  %v525 = vadd.f32 %v456, %v524
  %v526 = vpop.f32.mrb[0].mxu0
  %527 = vdwg.mxu0
  %528 = vmatprep.subr.mxu0 0.0
  %529 = vmatpush1.msra.mxu0 %v83
  %530 = vmatprep.subr.mxu0 0.0
  %531 = vmatpush1.msra.mxu0 %v84
  %532 = vmatprep.subr.mxu0 0.0
  %533 = vmatpush1.msra.mxu0 %v85
  %534 = vmatprep.subr.mxu0 0.0
  %535 = vmatpush1.msra.mxu0 %v86
  %536 = vmatprep.subr.mxu0 0.0
  %537 = vmatpush1.msra.mxu0 %v87
  %538 = vmatprep.subr.mxu0 0.0
  %539 = vmatpush1.msra.mxu0 %v88
  %540 = vmatprep.subr.mxu0 0.0
  %541 = vmatpush1.msra.mxu0 %v89
  %542 = vmatprep.subr.mxu0 0.0
  %543 = vmatpush1.msra.mxu0 %v90
  %544 = vmatprep.subr.mxu0 0.0
  %545 = vmatpush1.msra.mxu0 %v91
  %546 = vmatprep.subr.mxu0 0.0
  %547 = vmatpush1.msra.mxu0 %v92
  %548 = vmatprep.subr.mxu0 0.0
  %549 = vmatpush1.msra.mxu0 %v93
  %550 = vmatprep.subr.mxu0 0.0
  %551 = vmatpush1.msra.mxu0 %v94
  %552 = vmatprep.subr.mxu0 0.0
  %553 = vmatpush1.msra.mxu0 %v95
  %554 = vmatprep.subr.mxu0 0.0
  %555 = vmatpush1.msra.mxu0 %v96
  %556 = vmatprep.subr.mxu0 0.0
  %557 = vmatpush1.msra.mxu0 %v97
  %558 = vmatprep.subr.mxu0 0.0
  %559 = vmatpush1.msra.mxu0 %v98
  %560 = vmatprep.subr.mxu0 0.0
  %561 = vmatpush1.msra.mxu0 %v99
  %562 = vmatprep.subr.mxu0 0.0
  %563 = vmatpush1.msra.mxu0 %v100
  %564 = vmatprep.subr.mxu0 0.0
  %565 = vmatpush1.msra.mxu0 %v101
  %566 = vmatprep.subr.mxu0 0.0
  %567 = vmatpush1.msra.mxu0 %v102
  %568 = vmatprep.subr.mxu0 0.0
  %569 = vmatpush1.msra.mxu0 %v103
  %570 = vmatprep.subr.mxu0 0.0
  %571 = vmatpush1.msra.mxu0 %v104
  %572 = vmatprep.subr.mxu0 0.0
  %573 = vmatpush1.msra.mxu0 %v105
  %574 = vmatprep.subr.mxu0 0.0
  %575 = vmatpush1.msra.mxu0 %v106
  %576 = vmatprep.subr.mxu0 0.0
  %577 = vmatpush1.msra.mxu0 %v107
  %578 = vmatprep.subr.mxu0 0.0
  %579 = vmatpush1.msra.mxu0 %v108
  %580 = vmatprep.subr.mxu0 0.0
  %581 = vmatpush1.msra.mxu0 %v109
  %582 = vmatprep.subr.mxu0 0.0
  %583 = vmatpush1.msra.mxu0 %v110
  %584 = vmatprep.subr.mxu0 0.0
  %585 = vmatpush1.msra.mxu0 %v111
  %586 = vmatprep.subr.mxu0 0.0
  %587 = vmatpush1.msra.mxu0 %v112
  %588 = vmatprep.subr.mxu0 0.0
  %589 = vmatpush1.msra.mxu0 %v113
  %590 = vmatprep.subr.mxu0 0.0
  %591 = vmatpush1.msra.mxu0 %v114
  %592 = vmatprep.mubr.f32.mxu0 %v29
  %593 = vmatmul.mubr.f32.gmra.mrb[0].mxu0 %v28
  %v594 = vpop.f32.mrb[0].mxu0
  %v595 = vadd.f32 %v525, %v594
  %v596 = vpop.f32.mrb[0].mxu0
  %597 = vdwg.mxu0
  %598 = vmatprep.subr.mxu0 0.0
  %599 = vmatpush1.msra.mxu0 %v115
  %600 = vmatprep.subr.mxu0 0.0
  %601 = vmatpush1.msra.mxu0 %v116
  %602 = vmatprep.subr.mxu0 0.0
  %603 = vmatpush1.msra.mxu0 %v117
  %604 = vmatprep.subr.mxu0 0.0
  %605 = vmatpush1.msra.mxu0 %v118
  %606 = vmatprep.subr.mxu0 0.0
  %607 = vmatpush1.msra.mxu0 %v119
  %608 = vmatprep.subr.mxu0 0.0
  %609 = vmatpush1.msra.mxu0 %v120
  %610 = vmatprep.subr.mxu0 0.0
  %611 = vmatpush1.msra.mxu0 %v121
  %612 = vmatprep.subr.mxu0 0.0
  %613 = vmatpush1.msra.mxu0 %v122
  %614 = vmatprep.subr.mxu0 0.0
  %615 = vmatpush1.msra.mxu0 %v123
  %616 = vmatprep.subr.mxu0 0.0
  %617 = vmatpush1.msra.mxu0 %v124
  %618 = vmatprep.subr.mxu0 0.0
  %619 = vmatpush1.msra.mxu0 %v125
  %620 = vmatprep.subr.mxu0 0.0
  %621 = vmatpush1.msra.mxu0 %v126
  %622 = vmatprep.subr.mxu0 0.0
  %623 = vmatpush1.msra.mxu0 %v127
  %624 = vmatprep.subr.mxu0 0.0
  %625 = vmatpush1.msra.mxu0 %v128
  %626 = vmatprep.subr.mxu0 0.0
  %627 = vmatpush1.msra.mxu0 %v129
  %628 = vmatprep.subr.mxu0 0.0
  %629 = vmatpush1.msra.mxu0 %v130
  %630 = vmatprep.subr.mxu0 0.0
  %631 = vmatpush1.msra.mxu0 %v131
  %632 = vmatprep.subr.mxu0 0.0
  %633 = vmatpush1.msra.mxu0 %v132
  %634 = vmatprep.subr.mxu0 0.0
  %635 = vmatpush1.msra.mxu0 %v133
  %636 = vmatprep.subr.mxu0 0.0
  %637 = vmatpush1.msra.mxu0 %v134
  %638 = vmatprep.subr.mxu0 0.0
  %639 = vmatpush1.msra.mxu0 %v135
  %640 = vmatprep.subr.mxu0 0.0
  %641 = vmatpush1.msra.mxu0 %v136
  %642 = vmatprep.subr.mxu0 0.0
  %643 = vmatpush1.msra.mxu0 %v137
  %644 = vmatprep.subr.mxu0 0.0
  %645 = vmatpush1.msra.mxu0 %v138
  %646 = vmatprep.subr.mxu0 0.0
  %647 = vmatpush1.msra.mxu0 %v139
  %648 = vmatprep.subr.mxu0 0.0
  %649 = vmatpush1.msra.mxu0 %v140
  %650 = vmatprep.subr.mxu0 0.0
  %651 = vmatpush1.msra.mxu0 %v141
  %652 = vmatprep.subr.mxu0 0.0
  %653 = vmatpush1.msra.mxu0 %v142
  %654 = vmatprep.subr.mxu0 0.0
  %655 = vmatpush1.msra.mxu0 %v143
  %656 = vmatprep.subr.mxu0 0.0
  %657 = vmatpush1.msra.mxu0 %v144
  %658 = vmatprep.subr.mxu0 0.0
  %659 = vmatpush1.msra.mxu0 %v145
  %660 = vmatprep.subr.mxu0 0.0
  %661 = vmatpush1.msra.mxu0 %v146
  %662 = vmatprep.mubr.f32.mxu0 %v31
  %663 = vmatmul.mubr.f32.gmra.mrb[0].mxu0 %v30
  %v664 = vpop.f32.mrb[0].mxu0
  %v665 = vadd.f32 %v595, %v664
  %v666 = vpop.f32.mrb[0].mxu0
  %667 = vdwg.mxu0
  %668 = vmatprep.subr.mxu0 0.0
  %669 = vmatpush1.msra.mxu0 %v147
  %670 = vmatprep.subr.mxu0 0.0
  %671 = vmatpush1.msra.mxu0 %v148
  %672 = vmatprep.subr.mxu0 0.0
  %673 = vmatpush1.msra.mxu0 %v149
  %674 = vmatprep.subr.mxu0 0.0
  %675 = vmatpush1.msra.mxu0 %v150
  %676 = vmatprep.subr.mxu0 0.0
  %677 = vmatpush1.msra.mxu0 %v151
  %678 = vmatprep.subr.mxu0 0.0
  %679 = vmatpush1.msra.mxu0 %v152
  %680 = vmatprep.subr.mxu0 0.0
  %681 = vmatpush1.msra.mxu0 %v153
  %682 = vmatprep.subr.mxu0 0.0
  %683 = vmatpush1.msra.mxu0 %v154
  %684 = vmatprep.subr.mxu0 0.0
  %685 = vmatpush1.msra.mxu0 %v155
  %686 = vmatprep.subr.mxu0 0.0
  %687 = vmatpush1.msra.mxu0 %v156
  %688 = vmatprep.subr.mxu0 0.0
  %689 = vmatpush1.msra.mxu0 %v157
  %690 = vmatprep.subr.mxu0 0.0
  %691 = vmatpush1.msra.mxu0 %v158
  %692 = vmatprep.subr.mxu0 0.0
  %693 = vmatpush1.msra.mxu0 %v159
  %694 = vmatprep.subr.mxu0 0.0
  %695 = vmatpush1.msra.mxu0 %v160
  %696 = vmatprep.subr.mxu0 0.0
  %697 = vmatpush1.msra.mxu0 %v161
  %698 = vmatprep.subr.mxu0 0.0
  %699 = vmatpush1.msra.mxu0 %v162
  %700 = vmatprep.subr.mxu0 0.0
  %701 = vmatpush1.msra.mxu0 %v163
  %702 = vmatprep.subr.mxu0 0.0
  %703 = vmatpush1.msra.mxu0 %v164
  %704 = vmatprep.subr.mxu0 0.0
  %705 = vmatpush1.msra.mxu0 %v165
  %706 = vmatprep.subr.mxu0 0.0
  %707 = vmatpush1.msra.mxu0 %v166
  %708 = vmatprep.subr.mxu0 0.0
  %709 = vmatpush1.msra.mxu0 %v167
  %710 = vmatprep.subr.mxu0 0.0
  %711 = vmatpush1.msra.mxu0 %v168
  %712 = vmatprep.subr.mxu0 0.0
  %713 = vmatpush1.msra.mxu0 %v169
  %714 = vmatprep.subr.mxu0 0.0
  %715 = vmatpush1.msra.mxu0 %v170
  %716 = vmatprep.subr.mxu0 0.0
  %717 = vmatpush1.msra.mxu0 %v171
  %718 = vmatprep.subr.mxu0 0.0
  %719 = vmatpush1.msra.mxu0 %v172
  %720 = vmatprep.subr.mxu0 0.0
  %721 = vmatpush1.msra.mxu0 %v173
  %722 = vmatprep.subr.mxu0 0.0
  %723 = vmatpush1.msra.mxu0 %v174
  %724 = vmatprep.subr.mxu0 0.0
  %725 = vmatpush1.msra.mxu0 %v175
  %726 = vmatprep.subr.mxu0 0.0
  %727 = vmatpush1.msra.mxu0 %v176
  %728 = vmatprep.subr.mxu0 0.0
  %729 = vmatpush1.msra.mxu0 %v177
  %730 = vmatprep.subr.mxu0 0.0
  %731 = vmatpush1.msra.mxu0 %v178
  %732 = vmatprep.mubr.f32.mxu0 %v33
  %733 = vmatmul.mubr.f32.gmra.mrb[0].mxu0 %v32
  %v734 = vpop.f32.mrb[0].mxu0
  %v735 = vadd.f32 %v665, %v734
  %v736 = vpop.f32.mrb[0].mxu0
  %737 = vdwg.mxu0
  %738 = vmatprep.subr.mxu0 0.0
  %739 = vmatpush1.msra.mxu0 %v179
  %740 = vmatprep.subr.mxu0 0.0
  %741 = vmatpush1.msra.mxu0 %v180
  %742 = vmatprep.subr.mxu0 0.0
  %743 = vmatpush1.msra.mxu0 %v181
  %744 = vmatprep.subr.mxu0 0.0
  %745 = vmatpush1.msra.mxu0 %v182
  %746 = vmatprep.subr.mxu0 0.0
  %747 = vmatpush1.msra.mxu0 %v183
  %748 = vmatprep.subr.mxu0 0.0
  %749 = vmatpush1.msra.mxu0 %v184
  %750 = vmatprep.subr.mxu0 0.0
  %751 = vmatpush1.msra.mxu0 %v185
  %752 = vmatprep.subr.mxu0 0.0
  %753 = vmatpush1.msra.mxu0 %v186
  %754 = vmatprep.subr.mxu0 0.0
  %755 = vmatpush1.msra.mxu0 %v187
  %756 = vmatprep.subr.mxu0 0.0
  %757 = vmatpush1.msra.mxu0 %v188
  %758 = vmatprep.subr.mxu0 0.0
  %759 = vmatpush1.msra.mxu0 %v189
  %760 = vmatprep.subr.mxu0 0.0
  %761 = vmatpush1.msra.mxu0 %v190
  %762 = vmatprep.subr.mxu0 0.0
  %763 = vmatpush1.msra.mxu0 %v191
  %764 = vmatprep.subr.mxu0 0.0
  %765 = vmatpush1.msra.mxu0 %v192
  %766 = vmatprep.subr.mxu0 0.0
  %767 = vmatpush1.msra.mxu0 %v193
  %768 = vmatprep.subr.mxu0 0.0
  %769 = vmatpush1.msra.mxu0 %v194
  %770 = vmatprep.subr.mxu0 0.0
  %771 = vmatpush1.msra.mxu0 %v195
  %772 = vmatprep.subr.mxu0 0.0
  %773 = vmatpush1.msra.mxu0 %v196
  %774 = vmatprep.subr.mxu0 0.0
  %775 = vmatpush1.msra.mxu0 %v197
  %776 = vmatprep.subr.mxu0 0.0
  %777 = vmatpush1.msra.mxu0 %v198
  %778 = vmatprep.subr.mxu0 0.0
  %779 = vmatpush1.msra.mxu0 %v199
  %780 = vmatprep.subr.mxu0 0.0
  %781 = vmatpush1.msra.mxu0 %v200
  %782 = vmatprep.subr.mxu0 0.0
  %783 = vmatpush1.msra.mxu0 %v201
  %784 = vmatprep.subr.mxu0 0.0
  %785 = vmatpush1.msra.mxu0 %v202
  %786 = vmatprep.subr.mxu0 0.0
  %787 = vmatpush1.msra.mxu0 %v203
  %788 = vmatprep.subr.mxu0 0.0
  %789 = vmatpush1.msra.mxu0 %v204
  %790 = vmatprep.subr.mxu0 0.0
  %791 = vmatpush1.msra.mxu0 %v205
  %792 = vmatprep.subr.mxu0 0.0
  %793 = vmatpush1.msra.mxu0 %v206
  %794 = vmatprep.subr.mxu0 0.0
  %795 = vmatpush1.msra.mxu0 %v207
  %796 = vmatprep.subr.mxu0 0.0
  %797 = vmatpush1.msra.mxu0 %v208
  %798 = vmatprep.subr.mxu0 0.0
  %799 = vmatpush1.msra.mxu0 %v209
  %800 = vmatprep.subr.mxu0 0.0
  %801 = vmatpush1.msra.mxu0 %v210
  %802 = vmatprep.mubr.f32.mxu0 %v35
  %803 = vmatmul.mubr.f32.gmra.mrb[0].mxu0 %v34
  %v804 = vpop.f32.mrb[0].mxu0
  %v805 = vadd.f32 %v735, %v804
  %v806 = vpop.f32.mrb[0].mxu0
  %807 = vdwg.mxu0
  %808 = vmatprep.subr.mxu0 0.0
  %809 = vmatpush1.msra.mxu0 %v211
  %810 = vmatprep.subr.mxu0 0.0
  %811 = vmatpush1.msra.mxu0 %v212
  %812 = vmatprep.subr.mxu0 0.0
  %813 = vmatpush1.msra.mxu0 %v213
  %814 = vmatprep.subr.mxu0 0.0
  %815 = vmatpush1.msra.mxu0 %v214
  %816 = vmatprep.subr.mxu0 0.0
  %817 = vmatpush1.msra.mxu0 %v215
  %818 = vmatprep.subr.mxu0 0.0
  %819 = vmatpush1.msra.mxu0 %v216
  %820 = vmatprep.subr.mxu0 0.0
  %821 = vmatpush1.msra.mxu0 %v217
  %822 = vmatprep.subr.mxu0 0.0
  %823 = vmatpush1.msra.mxu0 %v218
  %824 = vmatprep.subr.mxu0 0.0
  %825 = vmatpush1.msra.mxu0 %v219
  %826 = vmatprep.subr.mxu0 0.0
  %827 = vmatpush1.msra.mxu0 %v220
  %828 = vmatprep.subr.mxu0 0.0
  %829 = vmatpush1.msra.mxu0 %v221
  %830 = vmatprep.subr.mxu0 0.0
  %831 = vmatpush1.msra.mxu0 %v222
  %832 = vmatprep.subr.mxu0 0.0
  %833 = vmatpush1.msra.mxu0 %v223
  %834 = vmatprep.subr.mxu0 0.0
  %835 = vmatpush1.msra.mxu0 %v224
  %836 = vmatprep.subr.mxu0 0.0
  %837 = vmatpush1.msra.mxu0 %v225
  %838 = vmatprep.subr.mxu0 0.0
  %839 = vmatpush1.msra.mxu0 %v226
  %840 = vmatprep.subr.mxu0 0.0
  %841 = vmatpush1.msra.mxu0 %v227
  %842 = vmatprep.subr.mxu0 0.0
  %843 = vmatpush1.msra.mxu0 %v228
  %844 = vmatprep.subr.mxu0 0.0
  %845 = vmatpush1.msra.mxu0 %v229
  %846 = vmatprep.subr.mxu0 0.0
  %847 = vmatpush1.msra.mxu0 %v230
  %848 = vmatprep.subr.mxu0 0.0
  %849 = vmatpush1.msra.mxu0 %v231
  %850 = vmatprep.subr.mxu0 0.0
  %851 = vmatpush1.msra.mxu0 %v232
  %852 = vmatprep.subr.mxu0 0.0
  %853 = vmatpush1.msra.mxu0 %v233
  %854 = vmatprep.subr.mxu0 0.0
  %855 = vmatpush1.msra.mxu0 %v234
  %856 = vmatprep.subr.mxu0 0.0
  %857 = vmatpush1.msra.mxu0 %v235
  %858 = vmatprep.subr.mxu0 0.0
  %859 = vmatpush1.msra.mxu0 %v236
  %860 = vmatprep.subr.mxu0 0.0
  %861 = vmatpush1.msra.mxu0 %v237
  %862 = vmatprep.subr.mxu0 0.0
  %863 = vmatpush1.msra.mxu0 %v238
  %864 = vmatprep.subr.mxu0 0.0
  %865 = vmatpush1.msra.mxu0 %v239
  %866 = vmatprep.subr.mxu0 0.0
  %867 = vmatpush1.msra.mxu0 %v240
  %868 = vmatprep.subr.mxu0 0.0
  %869 = vmatpush1.msra.mxu0 %v241
  %870 = vmatprep.subr.mxu0 0.0
  %871 = vmatpush1.msra.mxu0 %v242
  %872 = vmatprep.mubr.f32.mxu0 %v37
  %873 = vmatmul.mubr.f32.gmra.mrb[0].mxu0 %v36
  %v874 = vpop.f32.mrb[0].mxu0
  %v875 = vadd.f32 %v805, %v874
  %v876 = vpop.f32.mrb[0].mxu0
  %877 = vdwg.mxu0
  %878 = vmatprep.subr.mxu0 0.0
  %879 = vmatpush1.msra.mxu0 %v243
  %880 = vmatprep.subr.mxu0 0.0
  %881 = vmatpush1.msra.mxu0 %v244
  %882 = vmatprep.subr.mxu0 0.0
  %883 = vmatpush1.msra.mxu0 %v245
  %884 = vmatprep.subr.mxu0 0.0
  %885 = vmatpush1.msra.mxu0 %v246
  %886 = vmatprep.subr.mxu0 0.0
  %887 = vmatpush1.msra.mxu0 %v247
  %888 = vmatprep.subr.mxu0 0.0
  %889 = vmatpush1.msra.mxu0 %v248
  %890 = vmatprep.subr.mxu0 0.0
  %891 = vmatpush1.msra.mxu0 %v249
  %892 = vmatprep.subr.mxu0 0.0
  %893 = vmatpush1.msra.mxu0 %v250
  %894 = vmatprep.subr.mxu0 0.0
  %895 = vmatpush1.msra.mxu0 %v251
  %896 = vmatprep.subr.mxu0 0.0
  %897 = vmatpush1.msra.mxu0 %v252
  %898 = vmatprep.subr.mxu0 0.0
  %899 = vmatpush1.msra.mxu0 %v253
  %900 = vmatprep.subr.mxu0 0.0
  %901 = vmatpush1.msra.mxu0 %v254
  %902 = vmatprep.subr.mxu0 0.0
  %903 = vmatpush1.msra.mxu0 %v255
  %904 = vmatprep.subr.mxu0 0.0
  %905 = vmatpush1.msra.mxu0 %v256
  %906 = vmatprep.subr.mxu0 0.0
  %907 = vmatpush1.msra.mxu0 %v257
  %908 = vmatprep.subr.mxu0 0.0
  %909 = vmatpush1.msra.mxu0 %v258
  %910 = vmatprep.subr.mxu0 0.0
  %911 = vmatpush1.msra.mxu0 %v259
  %912 = vmatprep.subr.mxu0 0.0
  %913 = vmatpush1.msra.mxu0 %v260
  %914 = vmatprep.subr.mxu0 0.0
  %915 = vmatpush1.msra.mxu0 %v261
  %916 = vmatprep.subr.mxu0 0.0
  %917 = vmatpush1.msra.mxu0 %v262
  %918 = vmatprep.subr.mxu0 0.0
  %919 = vmatpush1.msra.mxu0 %v263
  %920 = vmatprep.subr.mxu0 0.0
  %921 = vmatpush1.msra.mxu0 %v264
  %922 = vmatprep.subr.mxu0 0.0
  %923 = vmatpush1.msra.mxu0 %v265
  %924 = vmatprep.subr.mxu0 0.0
  %925 = vmatpush1.msra.mxu0 %v266
  %926 = vmatprep.subr.mxu0 0.0
  %927 = vmatpush1.msra.mxu0 %v267
  %928 = vmatprep.subr.mxu0 0.0
  %929 = vmatpush1.msra.mxu0 %v268
  %930 = vmatprep.subr.mxu0 0.0
  %931 = vmatpush1.msra.mxu0 %v269
  %932 = vmatprep.subr.mxu0 0.0
  %933 = vmatpush1.msra.mxu0 %v270
  %934 = vmatprep.subr.mxu0 0.0
  %935 = vmatpush1.msra.mxu0 %v271
  %936 = vmatprep.subr.mxu0 0.0
  %937 = vmatpush1.msra.mxu0 %v272
  %938 = vmatprep.subr.mxu0 0.0
  %939 = vmatpush1.msra.mxu0 %v273
  %940 = vmatprep.subr.mxu0 0.0
  %941 = vmatpush1.msra.mxu0 %v274
  %942 = vmatprep.mubr.f32.mxu0 %v39
  %943 = vmatmul.mubr.f32.gmra.mrb[0].mxu0 %v38
  %v944 = vpop.f32.mrb[0].mxu0
  %v945 = vadd.f32 %v875, %v944
  %v946 = vpop.f32.mrb[0].mxu0
  %947 = vdwg.mxu0
  %948 = vmatprep.subr.mxu0 0.0
  %949 = vmatpush1.msra.mxu0 %v275
  %950 = vmatprep.subr.mxu0 0.0
  %951 = vmatpush1.msra.mxu0 %v276
  %952 = vmatprep.subr.mxu0 0.0
  %953 = vmatpush1.msra.mxu0 %v277
  %954 = vmatprep.subr.mxu0 0.0
  %955 = vmatpush1.msra.mxu0 %v278
  %956 = vmatprep.subr.mxu0 0.0
  %957 = vmatpush1.msra.mxu0 %v279
  %958 = vmatprep.subr.mxu0 0.0
  %959 = vmatpush1.msra.mxu0 %v280
  %960 = vmatprep.subr.mxu0 0.0
  %961 = vmatpush1.msra.mxu0 %v281
  %962 = vmatprep.subr.mxu0 0.0
  %963 = vmatpush1.msra.mxu0 %v282
  %964 = vmatprep.subr.mxu0 0.0
  %965 = vmatpush1.msra.mxu0 %v283
  %966 = vmatprep.subr.mxu0 0.0
  %967 = vmatpush1.msra.mxu0 %v284
  %968 = vmatprep.subr.mxu0 0.0
  %969 = vmatpush1.msra.mxu0 %v285
  %970 = vmatprep.subr.mxu0 0.0
  %971 = vmatpush1.msra.mxu0 %v286
  %972 = vmatprep.subr.mxu0 0.0
  %973 = vmatpush1.msra.mxu0 %v287
  %974 = vmatprep.subr.mxu0 0.0
  %975 = vmatpush1.msra.mxu0 %v288
  %976 = vmatprep.subr.mxu0 0.0
  %977 = vmatpush1.msra.mxu0 %v289
  %978 = vmatprep.subr.mxu0 0.0
  %979 = vmatpush1.msra.mxu0 %v290
  %980 = vmatprep.subr.mxu0 0.0
  %981 = vmatpush1.msra.mxu0 %v291
  %982 = vmatprep.subr.mxu0 0.0
  %983 = vmatpush1.msra.mxu0 %v292
  %984 = vmatprep.subr.mxu0 0.0
  %985 = vmatpush1.msra.mxu0 %v293
  %986 = vmatprep.subr.mxu0 0.0
  %987 = vmatpush1.msra.mxu0 %v294
  %988 = vmatprep.subr.mxu0 0.0
  %989 = vmatpush1.msra.mxu0 %v295
  %990 = vmatprep.subr.mxu0 0.0
  %991 = vmatpush1.msra.mxu0 %v296
  %992 = vmatprep.subr.mxu0 0.0
  %993 = vmatpush1.msra.mxu0 %v297
  %994 = vmatprep.subr.mxu0 0.0
  %995 = vmatpush1.msra.mxu0 %v298
  %996 = vmatprep.subr.mxu0 0.0
  %997 = vmatpush1.msra.mxu0 %v299
  %998 = vmatprep.subr.mxu0 0.0
  %999 = vmatpush1.msra.mxu0 %v300
  %1000 = vmatprep.subr.mxu0 0.0
  %1001 = vmatpush1.msra.mxu0 %v301
  %1002 = vmatprep.subr.mxu0 0.0
  %1003 = vmatpush1.msra.mxu0 %v302
  %1004 = vmatprep.subr.mxu0 0.0
  %1005 = vmatpush1.msra.mxu0 %v303
  %1006 = vmatprep.subr.mxu0 0.0
  %1007 = vmatpush1.msra.mxu0 %v304
  %1008 = vmatprep.subr.mxu0 0.0
  %1009 = vmatpush1.msra.mxu0 %v305
  %1010 = vmatprep.subr.mxu0 0.0
  %1011 = vmatpush1.msra.mxu0 %v306
  %1012 = vmatprep.mubr.f32.mxu0 %v41
  %1013 = vmatmul.mubr.f32.gmra.mrb[0].mxu0 %v40
  %v1014 = vpop.f32.mrb[0].mxu0
  %v1015 = vadd.f32 %v945, %v1014
  %v1016 = vpop.f32.mrb[0].mxu0
  %1017 = vdwg.mxu0
  %1018 = vmatprep.subr.mxu0 0.0
  %1019 = vmatpush1.msra.mxu0 %v307
  %1020 = vmatprep.subr.mxu0 0.0
  %1021 = vmatpush1.msra.mxu0 %v308
  %1022 = vmatprep.subr.mxu0 0.0
  %1023 = vmatpush1.msra.mxu0 %v309
  %1024 = vmatprep.subr.mxu0 0.0
  %1025 = vmatpush1.msra.mxu0 %v310
  %1026 = vmatprep.subr.mxu0 0.0
  %1027 = vmatpush1.msra.mxu0 %v311
  %1028 = vmatprep.subr.mxu0 0.0
  %1029 = vmatpush1.msra.mxu0 %v312
  %1030 = vmatprep.subr.mxu0 0.0
  %1031 = vmatpush1.msra.mxu0 %v313
  %1032 = vmatprep.subr.mxu0 0.0
  %1033 = vmatpush1.msra.mxu0 %v314
  %1034 = vmatprep.subr.mxu0 0.0
  %1035 = vmatpush1.msra.mxu0 %v315
  %1036 = vmatprep.subr.mxu0 0.0
  %1037 = vmatpush1.msra.mxu0 %v316
  %1038 = vmatprep.subr.mxu0 0.0
  %1039 = vmatpush1.msra.mxu0 %v317
  %1040 = vmatprep.subr.mxu0 0.0
  %1041 = vmatpush1.msra.mxu0 %v318
  %1042 = vmatprep.subr.mxu0 0.0
  %1043 = vmatpush1.msra.mxu0 %v319
  %1044 = vmatprep.subr.mxu0 0.0
  %1045 = vmatpush1.msra.mxu0 %v320
  %1046 = vmatprep.subr.mxu0 0.0
  %1047 = vmatpush1.msra.mxu0 %v321
  %1048 = vmatprep.subr.mxu0 0.0
  %1049 = vmatpush1.msra.mxu0 %v322
  %1050 = vmatprep.subr.mxu0 0.0
  %1051 = vmatpush1.msra.mxu0 %v323
  %1052 = vmatprep.subr.mxu0 0.0
  %1053 = vmatpush1.msra.mxu0 %v324
  %1054 = vmatprep.subr.mxu0 0.0
  %1055 = vmatpush1.msra.mxu0 %v325
  %1056 = vmatprep.subr.mxu0 0.0
  %1057 = vmatpush1.msra.mxu0 %v326
  %1058 = vmatprep.subr.mxu0 0.0
  %1059 = vmatpush1.msra.mxu0 %v327
  %1060 = vmatprep.subr.mxu0 0.0
  %1061 = vmatpush1.msra.mxu0 %v328
  %1062 = vmatprep.subr.mxu0 0.0
  %1063 = vmatpush1.msra.mxu0 %v329
  %1064 = vmatprep.subr.mxu0 0.0
  %1065 = vmatpush1.msra.mxu0 %v330
  %1066 = vmatprep.subr.mxu0 0.0
  %1067 = vmatpush1.msra.mxu0 %v331
  %1068 = vmatprep.subr.mxu0 0.0
  %1069 = vmatpush1.msra.mxu0 %v332
  %1070 = vmatprep.subr.mxu0 0.0
  %1071 = vmatpush1.msra.mxu0 %v333
  %1072 = vmatprep.subr.mxu0 0.0
  %1073 = vmatpush1.msra.mxu0 %v334
  %1074 = vmatprep.subr.mxu0 0.0
  %1075 = vmatpush1.msra.mxu0 %v335
  %1076 = vmatprep.subr.mxu0 0.0
  %1077 = vmatpush1.msra.mxu0 %v336
  %1078 = vmatprep.subr.mxu0 0.0
  %1079 = vmatpush1.msra.mxu0 %v337
  %1080 = vmatprep.subr.mxu0 0.0
  %1081 = vmatpush1.msra.mxu0 %v338
  %1082 = vmatprep.mubr.f32.mxu0 %v43
  %1083 = vmatmul.mubr.f32.gmra.mrb[0].mxu0 %v42
  %v1084 = vpop.f32.mrb[0].mxu0
  %v1085 = vadd.f32 %v1015, %v1084
  %v1086 = vpop.f32.mrb[0].mxu0
  %1087 = vdwg.mxu0
  %1088 = vmatprep.subr.mxu0 0.0
  %1089 = vmatpush1.msra.mxu0 %v339
  %1090 = vmatprep.subr.mxu0 0.0
  %1091 = vmatpush1.msra.mxu0 %v340
  %1092 = vmatprep.subr.mxu0 0.0
  %1093 = vmatpush1.msra.mxu0 %v341
  %1094 = vmatprep.subr.mxu0 0.0
  %1095 = vmatpush1.msra.mxu0 %v342
  %1096 = vmatprep.subr.mxu0 0.0
  %1097 = vmatpush1.msra.mxu0 %v343
  %1098 = vmatprep.subr.mxu0 0.0
  %1099 = vmatpush1.msra.mxu0 %v344
  %1100 = vmatprep.subr.mxu0 0.0
  %1101 = vmatpush1.msra.mxu0 %v345
  %1102 = vmatprep.subr.mxu0 0.0
  %1103 = vmatpush1.msra.mxu0 %v346
  %1104 = vmatprep.subr.mxu0 0.0
  %1105 = vmatpush1.msra.mxu0 %v347
  %1106 = vmatprep.subr.mxu0 0.0
  %1107 = vmatpush1.msra.mxu0 %v348
  %1108 = vmatprep.subr.mxu0 0.0
  %1109 = vmatpush1.msra.mxu0 %v349
  %1110 = vmatprep.subr.mxu0 0.0
  %1111 = vmatpush1.msra.mxu0 %v350
  %1112 = vmatprep.subr.mxu0 0.0
  %1113 = vmatpush1.msra.mxu0 %v351
  %1114 = vmatprep.subr.mxu0 0.0
  %1115 = vmatpush1.msra.mxu0 %v352
  %1116 = vmatprep.subr.mxu0 0.0
  %1117 = vmatpush1.msra.mxu0 %v353
  %1118 = vmatprep.subr.mxu0 0.0
  %1119 = vmatpush1.msra.mxu0 %v354
  %1120 = vmatprep.subr.mxu0 0.0
  %1121 = vmatpush1.msra.mxu0 %v355
  %1122 = vmatprep.subr.mxu0 0.0
  %1123 = vmatpush1.msra.mxu0 %v356
  %1124 = vmatprep.subr.mxu0 0.0
  %1125 = vmatpush1.msra.mxu0 %v357
  %1126 = vmatprep.subr.mxu0 0.0
  %1127 = vmatpush1.msra.mxu0 %v358
  %1128 = vmatprep.subr.mxu0 0.0
  %1129 = vmatpush1.msra.mxu0 %v359
  %1130 = vmatprep.subr.mxu0 0.0
  %1131 = vmatpush1.msra.mxu0 %v360
  %1132 = vmatprep.subr.mxu0 0.0
  %1133 = vmatpush1.msra.mxu0 %v361
  %1134 = vmatprep.subr.mxu0 0.0
  %1135 = vmatpush1.msra.mxu0 %v362
  %1136 = vmatprep.subr.mxu0 0.0
  %1137 = vmatpush1.msra.mxu0 %v363
  %1138 = vmatprep.subr.mxu0 0.0
  %1139 = vmatpush1.msra.mxu0 %v364
  %1140 = vmatprep.subr.mxu0 0.0
  %1141 = vmatpush1.msra.mxu0 %v365
  %1142 = vmatprep.subr.mxu0 0.0
  %1143 = vmatpush1.msra.mxu0 %v366
  %1144 = vmatprep.subr.mxu0 0.0
  %1145 = vmatpush1.msra.mxu0 %v367
  %1146 = vmatprep.subr.mxu0 0.0
  %1147 = vmatpush1.msra.mxu0 %v368
  %1148 = vmatprep.subr.mxu0 0.0
  %1149 = vmatpush1.msra.mxu0 %v369
  %1150 = vmatprep.subr.mxu0 0.0
  %1151 = vmatpush1.msra.mxu0 %v370
  %1152 = vmatprep.mubr.f32.mxu0 %v45
  %1153 = vmatmul.mubr.f32.gmra.mrb[0].mxu0 %v44
  %v1154 = vpop.f32.mrb[0].mxu0
  %v1155 = vadd.f32 %v1085, %v1154
  %v1156 = vpop.f32.mrb[0].mxu0
  %1157 = vdwg.mxu0
  %1158 = vmatprep.subr.mxu0 0.0
  %1159 = vmatpush1.msra.mxu0 %v371
  %1160 = vmatprep.subr.mxu0 0.0
  %1161 = vmatpush1.msra.mxu0 %v372
  %1162 = vmatprep.subr.mxu0 0.0
  %1163 = vmatpush1.msra.mxu0 %v373
  %1164 = vmatprep.subr.mxu0 0.0
  %1165 = vmatpush1.msra.mxu0 %v374
  %1166 = vmatprep.subr.mxu0 0.0
  %1167 = vmatpush1.msra.mxu0 %v375
  %1168 = vmatprep.subr.mxu0 0.0
  %1169 = vmatpush1.msra.mxu0 %v376
  %1170 = vmatprep.subr.mxu0 0.0
  %1171 = vmatpush1.msra.mxu0 %v377
  %1172 = vmatprep.subr.mxu0 0.0
  %1173 = vmatpush1.msra.mxu0 %v378
  %1174 = vmatprep.subr.mxu0 0.0
  %1175 = vmatpush1.msra.mxu0 %v379
  %1176 = vmatprep.subr.mxu0 0.0
  %1177 = vmatpush1.msra.mxu0 %v380
  %1178 = vmatprep.subr.mxu0 0.0
  %1179 = vmatpush1.msra.mxu0 %v381
  %1180 = vmatprep.subr.mxu0 0.0
  %1181 = vmatpush1.msra.mxu0 %v382
  %1182 = vmatprep.subr.mxu0 0.0
  %1183 = vmatpush1.msra.mxu0 %v383
  %1184 = vmatprep.subr.mxu0 0.0
  %1185 = vmatpush1.msra.mxu0 %v384
  %1186 = vmatprep.subr.mxu0 0.0
  %1187 = vmatpush1.msra.mxu0 %v385
  %1188 = vmatprep.subr.mxu0 0.0
  %1189 = vmatpush1.msra.mxu0 %v386
  %1190 = vmatprep.subr.mxu0 0.0
  %1191 = vmatpush1.msra.mxu0 %v387
  %1192 = vmatprep.subr.mxu0 0.0
  %1193 = vmatpush1.msra.mxu0 %v388
  %1194 = vmatprep.subr.mxu0 0.0
  %1195 = vmatpush1.msra.mxu0 %v389
  %1196 = vmatprep.subr.mxu0 0.0
  %1197 = vmatpush1.msra.mxu0 %v390
  %1198 = vmatprep.subr.mxu0 0.0
  %1199 = vmatpush1.msra.mxu0 %v391
  %1200 = vmatprep.subr.mxu0 0.0
  %1201 = vmatpush1.msra.mxu0 %v392
  %1202 = vmatprep.subr.mxu0 0.0
  %1203 = vmatpush1.msra.mxu0 %v393
  %1204 = vmatprep.subr.mxu0 0.0
  %1205 = vmatpush1.msra.mxu0 %v394
  %1206 = vmatprep.subr.mxu0 0.0
  %1207 = vmatpush1.msra.mxu0 %v395
  %1208 = vmatprep.subr.mxu0 0.0
  %1209 = vmatpush1.msra.mxu0 %v396
  %1210 = vmatprep.subr.mxu0 0.0
  %1211 = vmatpush1.msra.mxu0 %v397
  %1212 = vmatprep.subr.mxu0 0.0
  %1213 = vmatpush1.msra.mxu0 %v398
  %1214 = vmatprep.subr.mxu0 0.0
  %1215 = vmatpush1.msra.mxu0 %v399
  %1216 = vmatprep.subr.mxu0 0.0
  %1217 = vmatpush1.msra.mxu0 %v400
  %1218 = vmatprep.subr.mxu0 0.0
  %1219 = vmatpush1.msra.mxu0 %v401
  %1220 = vmatprep.subr.mxu0 0.0
  %1221 = vmatpush1.msra.mxu0 %v402
  %1222 = vmatprep.mubr.f32.mxu0 %v47
  %1223 = vmatmul.mubr.f32.gmra.mrb[0].mxu0 %v46
  %v1224 = vpop.f32.mrb[0].mxu0
  %v1225 = vadd.f32 %v1155, %v1224
  %v1226 = vpop.f32.mrb[0].mxu0
  %1227 = vdwg.mxu0
  %1228 = vmatprep.subr.mxu0 0.0
  %1229 = vmatpush1.msra.mxu0 %v403
  %1230 = vmatprep.subr.mxu0 0.0
  %1231 = vmatpush1.msra.mxu0 %v404
  %1232 = vmatprep.subr.mxu0 0.0
  %1233 = vmatpush1.msra.mxu0 %v405
  %1234 = vmatprep.subr.mxu0 0.0
  %1235 = vmatpush1.msra.mxu0 %v406
  %1236 = vmatprep.subr.mxu0 0.0
  %1237 = vmatpush1.msra.mxu0 %v407
  %1238 = vmatprep.subr.mxu0 0.0
  %1239 = vmatpush1.msra.mxu0 %v408
  %1240 = vmatprep.subr.mxu0 0.0
  %1241 = vmatpush1.msra.mxu0 %v409
  %1242 = vmatprep.subr.mxu0 0.0
  %1243 = vmatpush1.msra.mxu0 %v410
  %1244 = vmatprep.subr.mxu0 0.0
  %1245 = vmatpush1.msra.mxu0 %v411
  %1246 = vmatprep.subr.mxu0 0.0
  %1247 = vmatpush1.msra.mxu0 %v412
  %1248 = vmatprep.subr.mxu0 0.0
  %1249 = vmatpush1.msra.mxu0 %v413
  %1250 = vmatprep.subr.mxu0 0.0
  %1251 = vmatpush1.msra.mxu0 %v414
  %1252 = vmatprep.subr.mxu0 0.0
  %1253 = vmatpush1.msra.mxu0 %v415
  %1254 = vmatprep.subr.mxu0 0.0
  %1255 = vmatpush1.msra.mxu0 %v416
  %1256 = vmatprep.subr.mxu0 0.0
  %1257 = vmatpush1.msra.mxu0 %v417
  %1258 = vmatprep.subr.mxu0 0.0
  %1259 = vmatpush1.msra.mxu0 %v418
  %1260 = vmatprep.subr.mxu0 0.0
  %1261 = vmatpush1.msra.mxu0 %v419
  %1262 = vmatprep.subr.mxu0 0.0
  %1263 = vmatpush1.msra.mxu0 %v420
  %1264 = vmatprep.subr.mxu0 0.0
  %1265 = vmatpush1.msra.mxu0 %v421
  %1266 = vmatprep.subr.mxu0 0.0
  %1267 = vmatpush1.msra.mxu0 %v422
  %1268 = vmatprep.subr.mxu0 0.0
  %1269 = vmatpush1.msra.mxu0 %v423
  %1270 = vmatprep.subr.mxu0 0.0
  %1271 = vmatpush1.msra.mxu0 %v424
  %1272 = vmatprep.subr.mxu0 0.0
  %1273 = vmatpush1.msra.mxu0 %v425
  %1274 = vmatprep.subr.mxu0 0.0
  %1275 = vmatpush1.msra.mxu0 %v426
  %1276 = vmatprep.subr.mxu0 0.0
  %1277 = vmatpush1.msra.mxu0 %v427
  %1278 = vmatprep.subr.mxu0 0.0
  %1279 = vmatpush1.msra.mxu0 %v428
  %1280 = vmatprep.subr.mxu0 0.0
  %1281 = vmatpush1.msra.mxu0 %v429
  %1282 = vmatprep.subr.mxu0 0.0
  %1283 = vmatpush1.msra.mxu0 %v430
  %1284 = vmatprep.subr.mxu0 0.0
  %1285 = vmatpush1.msra.mxu0 %v431
  %1286 = vmatprep.subr.mxu0 0.0
  %1287 = vmatpush1.msra.mxu0 %v432
  %1288 = vmatprep.subr.mxu0 0.0
  %1289 = vmatpush1.msra.mxu0 %v433
  %1290 = vmatprep.subr.mxu0 0.0
  %1291 = vmatpush1.msra.mxu0 %v434
  %1292 = vmatprep.mubr.f32.mxu0 %v49
  %1293 = vmatmul.mubr.f32.gmra.mrb[0].mxu0 %v48
  %v1294 = vpop.f32.mrb[0].mxu0
  %v1295 = vadd.f32 %v1225, %v1294
  %v1296 = vpop.f32.mrb[0].mxu0
  %1297 = vdwg.mxu0
  %1298 = vmatprep.subr.mxu0 0.0
  %1299 = vmatpush1.msra.mxu0 %v435
  %1300 = vmatprep.subr.mxu0 0.0
  %1301 = vmatpush1.msra.mxu0 %v436
  %1302 = vmatprep.subr.mxu0 0.0
  %1303 = vmatpush1.msra.mxu0 %v437
  %1304 = vmatprep.subr.mxu0 0.0
  %1305 = vmatpush1.msra.mxu0 %v438
  %1306 = vmatprep.subr.mxu0 0.0
  %1307 = vmatpush1.msra.mxu0 %v439
  %1308 = vmatprep.subr.mxu0 0.0
  %1309 = vmatpush1.msra.mxu0 %v440
  %1310 = vmatprep.subr.mxu0 0.0
  %1311 = vmatpush1.msra.mxu0 %v441
  %1312 = vmatprep.subr.mxu0 0.0
  %1313 = vmatpush1.msra.mxu0 %v442
  %1314 = vmatprep.subr.mxu0 0.0
  %1315 = vmatpush1.msra.mxu0 %v443
  %1316 = vmatprep.subr.mxu0 0.0
  %1317 = vmatpush1.msra.mxu0 %v444
  %1318 = vmatprep.subr.mxu0 0.0
  %1319 = vmatpush1.msra.mxu0 %v445
  %1320 = vmatprep.subr.mxu0 0.0
  %1321 = vmatpush1.msra.mxu0 %v446
  %1322 = vmatprep.subr.mxu0 0.0
  %1323 = vmatpush1.msra.mxu0 %v447
  %1324 = vmatprep.subr.mxu0 0.0
  %1325 = vmatpush1.msra.mxu0 %v448
  %1326 = vmatprep.subr.mxu0 0.0
  %1327 = vmatpush1.msra.mxu0 %v449
  %1328 = vmatprep.subr.mxu0 0.0
  %1329 = vmatpush1.msra.mxu0 %v450
  %1330 = vmatprep.subr.mxu0 0.0
  %1331 = vmatpush1.msra.mxu0 0.0
  %1332 = vmatprep.subr.mxu0 0.0
  %1333 = vmatpush1.msra.mxu0 0.0
  %1334 = vmatprep.subr.mxu0 0.0
  %1335 = vmatpush1.msra.mxu0 0.0
  %1336 = vmatprep.subr.mxu0 0.0
  %1337 = vmatpush1.msra.mxu0 0.0
  %1338 = vmatprep.subr.mxu0 0.0
  %1339 = vmatpush1.msra.mxu0 0.0
  %1340 = vmatprep.subr.mxu0 0.0
  %1341 = vmatpush1.msra.mxu0 0.0
  %1342 = vmatprep.subr.mxu0 0.0
  %1343 = vmatpush1.msra.mxu0 0.0
  %1344 = vmatprep.subr.mxu0 0.0
  %1345 = vmatpush1.msra.mxu0 0.0
  %1346 = vmatprep.subr.mxu0 0.0
  %1347 = vmatpush1.msra.mxu0 0.0
  %1348 = vmatprep.subr.mxu0 0.0
  %1349 = vmatpush1.msra.mxu0 0.0
  %1350 = vmatprep.subr.mxu0 0.0
  %1351 = vmatpush1.msra.mxu0 0.0
  %1352 = vmatprep.subr.mxu0 0.0
  %1353 = vmatpush1.msra.mxu0 0.0
  %1354 = vmatprep.subr.mxu0 0.0
  %1355 = vmatpush1.msra.mxu0 0.0
  %1356 = vmatprep.subr.mxu0 0.0
  %1357 = vmatpush1.msra.mxu0 0.0
  %1358 = vmatprep.subr.mxu0 0.0
  %1359 = vmatpush1.msra.mxu0 0.0
  %1360 = vmatprep.subr.mxu0 0.0
  %1361 = vmatpush1.msra.mxu0 0.0
  %1362 = vmatprep.mubr.f32.mxu0 0.0
  %1363 = vmatmul.mubr.f32.gmra.mrb[0].mxu0 %v50
  %v1364 = vpop.f32.mrb[0].mxu0
  %v1365 = vadd.f32 %v1295, %v1364
  %v1366 = vpop.f32.mrb[0].mxu0
  %1367 = vdwg.mxu0
  %v1368 = vmax.f32 %v1365, 0.0
  %v1369 = vld [vmem:[%s3] sm:$0xff]
  %v1370 = vld [vmem:[%s3 + $0x8] sm:$0xff]
  %v1371 = vld [vmem:[%s3 + $0x10] sm:$0xff]
  %v1372 = vld [vmem:[%s3 + $0x18] sm:$0xff]
  %v1373 = vld [vmem:[%s3 + $0x20] sm:$0x7f]
  %v1374 = vld [vmem:[%s4] sm:$0x1]
  %v1376 = vlaneseq
  %v1377 = vshrl.u32 %v1376, 7
  %v1378 = vsub.s32 0, %v1377
  %v1379 = vrot.slane %v1374, %v1378
  %vm1381 = vcmask 318464
  %v1383 = vsel %vm1381, %v1368, 0
  %vm1385 = vcmask 1046528
  %v1387 = vsel %vm1385, %v1373, 0
  %1389 = vmatprep.subr.mxu0 0.0
  %1390 = vmatpush1.msra.mxu0 %v1369
  %1391 = vmatprep.subr.mxu0 0.0
  %1392 = vmatpush1.msra.mxu0 %v1370
  %1393 = vmatprep.subr.mxu0 0.0
  %1394 = vmatpush1.msra.mxu0 %v1371
  %1395 = vmatprep.subr.mxu0 0.0
  %1396 = vmatpush1.msra.mxu0 %v1372
  %1397 = vmatprep.subr.mxu0 0.0
  %1398 = vmatpush1.msra.mxu0 %v1387
  %1399 = vmatprep.subr.mxu0 0.0
  %1400 = vmatpush1.msra.mxu0 0.0
  %1401 = vmatprep.subr.mxu0 0.0
  %1402 = vmatpush1.msra.mxu0 0.0
  %1403 = vmatprep.subr.mxu0 0.0
  %1404 = vmatpush1.msra.mxu0 0.0
  %1405 = vmatprep.subr.mxu0 0.0
  %1406 = vmatpush1.msra.mxu0 0.0
  %1407 = vmatprep.subr.mxu0 0.0
  %1408 = vmatpush1.msra.mxu0 0.0
  %1409 = vmatprep.subr.mxu0 0.0
  %1410 = vmatpush1.msra.mxu0 0.0
  %1411 = vmatprep.subr.mxu0 0.0
  %1412 = vmatpush1.msra.mxu0 0.0
  %1413 = vmatprep.subr.mxu0 0.0
  %1414 = vmatpush1.msra.mxu0 0.0
  %1415 = vmatprep.subr.mxu0 0.0
  %1416 = vmatpush1.msra.mxu0 0.0
  %1417 = vmatprep.subr.mxu0 0.0
  %1418 = vmatpush1.msra.mxu0 0.0
  %1419 = vmatprep.subr.mxu0 0.0
  %1420 = vmatpush1.msra.mxu0 0.0
  %1421 = vmatprep.subr.mxu0 0.0
  %1422 = vmatpush1.msra.mxu0 0.0
  %1423 = vmatprep.subr.mxu0 0.0
  %1424 = vmatpush1.msra.mxu0 0.0
  %1425 = vmatprep.subr.mxu0 0.0
  %1426 = vmatpush1.msra.mxu0 0.0
  %1427 = vmatprep.subr.mxu0 0.0
  %1428 = vmatpush1.msra.mxu0 0.0
  %1429 = vmatprep.subr.mxu0 0.0
  %1430 = vmatpush1.msra.mxu0 0.0
  %1431 = vmatprep.subr.mxu0 0.0
  %1432 = vmatpush1.msra.mxu0 0.0
  %1433 = vmatprep.subr.mxu0 0.0
  %1434 = vmatpush1.msra.mxu0 0.0
  %1435 = vmatprep.subr.mxu0 0.0
  %1436 = vmatpush1.msra.mxu0 0.0
  %1437 = vmatprep.subr.mxu0 0.0
  %1438 = vmatpush1.msra.mxu0 0.0
  %1439 = vmatprep.subr.mxu0 0.0
  %1440 = vmatpush1.msra.mxu0 0.0
  %1441 = vmatprep.subr.mxu0 0.0
  %1442 = vmatpush1.msra.mxu0 0.0
  %1443 = vmatprep.subr.mxu0 0.0
  %1444 = vmatpush1.msra.mxu0 0.0
  %1445 = vmatprep.subr.mxu0 0.0
  %1446 = vmatpush1.msra.mxu0 0.0
  %1447 = vmatprep.subr.mxu0 0.0
  %1448 = vmatpush1.msra.mxu0 0.0
  %1449 = vmatprep.subr.mxu0 0.0
  %1450 = vmatpush1.msra.mxu0 0.0
  %1451 = vmatprep.subr.mxu0 0.0
  %1452 = vmatpush1.msra.mxu0 0.0
  %1453 = vmatprep.mubr.f32.mxu0 0.0
  %1454 = vmatmul.mubr.f32.gmra.mrb[0].mxu0 %v1383
  %v1455 = vpop.f32.mrb[0].mxu0
  %v1456 = vadd.f32 %v1379, %v1455
  %v1457 = vpop.f32.mrb[0].mxu0
  %1458 = vdwg.mxu0
  %v1459 = vmax.f32 %v1456, 0.0
  %v1460 = vld [vmem:[%s5] sm:$0xff]
  %v1461 = vld [vmem:[%s5 + $0x8] sm:$0x3]
  %v1462 = vld [vmem:[%s6] sm:$0x1]
  %v1464 = vlaneseq
  %v1465 = vshrl.u32 %v1464, 7
  %v1466 = vsub.s32 0, %v1465
  %v1467 = vrot.slane %v1462, %v1466
  %vm1469 = vcmask 80896
  %v1471 = vsel %vm1469, %v1459, 0
  %vm1473 = vcmask 1041408
  %v1475 = vsel %vm1473, %v1461, 0
  %1477 = vmatprep.subr.mxu0 0.0
  %1478 = vmatpush1.msra.mxu0 %v1460
  %1479 = vmatprep.subr.mxu0 0.0
  %1480 = vmatpush1.msra.mxu0 %v1475
  %1481 = vmatprep.subr.mxu0 0.0
  %1482 = vmatpush1.msra.mxu0 0.0
  %1483 = vmatprep.subr.mxu0 0.0
  %1484 = vmatpush1.msra.mxu0 0.0
  %1485 = vmatprep.subr.mxu0 0.0
  %1486 = vmatpush1.msra.mxu0 0.0
  %1487 = vmatprep.subr.mxu0 0.0
  %1488 = vmatpush1.msra.mxu0 0.0
  %1489 = vmatprep.subr.mxu0 0.0
  %1490 = vmatpush1.msra.mxu0 0.0
  %1491 = vmatprep.subr.mxu0 0.0
  %1492 = vmatpush1.msra.mxu0 0.0
  %1493 = vmatprep.subr.mxu0 0.0
  %1494 = vmatpush1.msra.mxu0 0.0
  %1495 = vmatprep.subr.mxu0 0.0
  %1496 = vmatpush1.msra.mxu0 0.0
  %1497 = vmatprep.subr.mxu0 0.0
  %1498 = vmatpush1.msra.mxu0 0.0
  %1499 = vmatprep.subr.mxu0 0.0
  %1500 = vmatpush1.msra.mxu0 0.0
  %1501 = vmatprep.subr.mxu0 0.0
  %1502 = vmatpush1.msra.mxu0 0.0
  %1503 = vmatprep.subr.mxu0 0.0
  %1504 = vmatpush1.msra.mxu0 0.0
  %1505 = vmatprep.subr.mxu0 0.0
  %1506 = vmatpush1.msra.mxu0 0.0
  %1507 = vmatprep.subr.mxu0 0.0
  %1508 = vmatpush1.msra.mxu0 0.0
  %1509 = vmatprep.subr.mxu0 0.0
  %1510 = vmatpush1.msra.mxu0 0.0
  %1511 = vmatprep.subr.mxu0 0.0
  %1512 = vmatpush1.msra.mxu0 0.0
  %1513 = vmatprep.subr.mxu0 0.0
  %1514 = vmatpush1.msra.mxu0 0.0
  %1515 = vmatprep.subr.mxu0 0.0
  %1516 = vmatpush1.msra.mxu0 0.0
  %1517 = vmatprep.subr.mxu0 0.0
  %1518 = vmatpush1.msra.mxu0 0.0
  %1519 = vmatprep.subr.mxu0 0.0
  %1520 = vmatpush1.msra.mxu0 0.0
  %1521 = vmatprep.subr.mxu0 0.0
  %1522 = vmatpush1.msra.mxu0 0.0
  %1523 = vmatprep.subr.mxu0 0.0
  %1524 = vmatpush1.msra.mxu0 0.0
  %1525 = vmatprep.subr.mxu0 0.0
  %1526 = vmatpush1.msra.mxu0 0.0
  %1527 = vmatprep.subr.mxu0 0.0
  %1528 = vmatpush1.msra.mxu0 0.0
  %1529 = vmatprep.subr.mxu0 0.0
  %1530 = vmatpush1.msra.mxu0 0.0
  %1531 = vmatprep.subr.mxu0 0.0
  %1532 = vmatpush1.msra.mxu0 0.0
  %1533 = vmatprep.subr.mxu0 0.0
  %1534 = vmatpush1.msra.mxu0 0.0
  %1535 = vmatprep.subr.mxu0 0.0
  %1536 = vmatpush1.msra.mxu0 0.0
  %1537 = vmatprep.subr.mxu0 0.0
  %1538 = vmatpush1.msra.mxu0 0.0
  %1539 = vmatprep.subr.mxu0 0.0
  %1540 = vmatpush1.msra.mxu0 0.0
  %1541 = vmatprep.mubr.f32.mxu0 0.0
  %1542 = vmatmul.mubr.f32.gmra.mrb[0].mxu0 %v1471
  %v1543 = vpop.f32.mrb[0].mxu0
  %v1544 = vadd.f32 %v1467, %v1543
  %v1545 = vpop.f32.mrb[0].mxu0
  %1546 = vdwg.mxu0
  %v1547 = vand.u32 2147483647, %v1544
  %v1548 = vsub.f32 0.0, %v1547
  %v1549 = vmul.f32 %v1548, 1.442695
  %v1550 = vpow.pop %v1549
  %v1551 = vadd.f32 %v1550, 1.0
  %v1552 = vrcp.pop %v1551
  %v1553 = vmul.f32 1.0, %v1552
  %vm1554 = vcmp.ge.f32.partialorder %v1544, 0.0
  %v1555 = vsub.f32 1.0, %v1553
  %v1556 = vsel %vm1554, %v1553, %v1555
  %vm1557 = vcmask 39936
  %1558 = vst.msk [vmem:[%s7] sm:$0xff] %vm1557, %v1556
  // Predicated region
  $region30: #{alexnet_forward_pallas.9} parent=0 // pred_check
    _
  $region31: #{alexnet_forward_pallas.9} parent=0 // pred_check_branch
    %1560 = sbr.rel (0) target = $region33
  $region32: #{alexnet_forward_pallas.9} parent=0 // pred_region
    _
  $region33: #{alexnet_forward_pallas.9} parent=0 // pred_fallthru
    _
  // Predicated region
  $region34: #{alexnet_forward_pallas.9} parent=0 // pred_check
    _
  $region35: #{alexnet_forward_pallas.9} parent=0 // pred_check_branch
    %1562 = sbr.rel (0) target = $region37
  $region36: #{alexnet_forward_pallas.9} parent=0 // pred_region
    _
  $region37: #{alexnet_forward_pallas.9} parent=0 // pred_fallthru
    _

</llo_original>
